<compile_context>
chip_gen: v5e
topology: v5e:2x2
jax: 0.10.0
libtpu: 0.0.40
codegen_flags: <defaults>
</compile_context>

<pallas_src>
import functools

import numpy as np
import jax
import jax.numpy as jnp
from jax.experimental import pallas as pl
from jax.experimental.pallas import tpu as pltpu


def _round_up(x, m):
    return ((x + m - 1) // m) * m


def _cdiv(a, b):
    return -(-a // b)


# ---------------------------------------------------------------------------
# Pallas kernels
# ---------------------------------------------------------------------------
def _mm_kernel(a_ref, b_ref, s_ref, c_ref, o_ref, *, act):
    """Single-shot bf16 matmul (full K per block) + fused scale/bias/activation.

    a_ref: (tm, Kp) bf16, b_ref: (Kp, tn) bf16, s_ref/c_ref: (1, tn) f32.
    """
    y = jnp.dot(a_ref[...], b_ref[...], preferred_element_type=jnp.float32)
    y = y * s_ref[...] + c_ref[...]
    if act == "leaky_relu":
        y = jnp.maximum(y, 0.2 * y)          # vmul + vmax (no compare/select)
    o_ref[...] = y.astype(o_ref.dtype)


def _maxpool_kernel(p_ref, o_ref):
    """2x2 max pool: elementwise max over the 4 pre-sliced taps (4, tm, C)."""
    o_ref[...] = jnp.maximum(jnp.maximum(p_ref[0], p_ref[1]),
                             jnp.maximum(p_ref[2], p_ref[3]))


# ---------------------------------------------------------------------------
# Kernel wrappers
# ---------------------------------------------------------------------------
def matmul_fused(a, w_p, s_p, b_p, n_out, act=None, out_dtype=jnp.float32):
    """act((a @ w) * scale + bias).

    a   : (M, K)  activation (any float dtype, cast to bf16 here)
    w_p : (Kp, Np) bf16, pre-padded weight   (Kp >= K, Np multiple of 128)
    s_p : (1, Np)  f32 fused scale (folded BN gamma/var; zeros in padding)
    b_p : (1, Np)  f32 fused bias  (conv bias + folded BN; zeros in padding)
    Returns out_dtype (M, n_out).
    """
    M, K = a.shape
    Kp, Np = w_p.shape
    assert K <= Kp and Np % 128 == 0

    # M tiling: pick a tile that covers M with no (or minimal) padded rows.
    # NOTE: drop the 256 threshold if large-batch v7x megacore sharding of the
    # small layers (conv2/FC) ever matters; at B=2 a single block is best.
    nb_m = max(1, _cdiv(M, 256))
    tm = _round_up(max(_cdiv(M, nb_m), 16), 16)   # 16 = bf16 sublane pack
    Mp = nb_m * tm

    # N tiling: keep a few lane-dense blocks so weight DMA pipelines.
    if Np >= 1024 and Np % 512 == 0:
        tn = 512
    elif Np >= 512 and Np % 256 == 0:
        tn = 256
    else:
        tn = 128

    # Single fused pad (no zeros + dynamic-update-slice double pass).
    a_p = jnp.pad(a.astype(jnp.bfloat16), ((0, Mp - M), (0, Kp - K)))

    grid = (Mp // tm, Np // tn)
    out = pl.pallas_call(
        functools.partial(_mm_kernel, act=act),
        out_shape=jax.ShapeDtypeStruct((Mp, Np), out_dtype),
        grid_spec=pltpu.PrefetchScalarGridSpec(
            num_scalar_prefetch=0,
            grid=grid,
            in_specs=[
                pl.BlockSpec((tm, Kp), lambda i, j: (i, 0)),   # full K: no K-loop
                pl.BlockSpec((Kp, tn), lambda i, j: (0, j)),
                pl.BlockSpec((1, tn), lambda i, j: (0, j)),
                pl.BlockSpec((1, tn), lambda i, j: (0, j)),
            ],
            out_specs=pl.BlockSpec((tm, tn), lambda i, j: (i, j)),
        ),
        compiler_params=pltpu.CompilerParams(
            dimension_semantics=("parallel", "parallel")),
    )(a_p, w_p, s_p, b_p)
    return out[:M, :n_out]


def maxpool2x2(x):
    """MaxPool2d(2, 2) on NHWC input (spatial dims assumed even)."""
    B, H, W, C = x.shape
    Ho, Wo = H // 2, W // 2
    taps = jnp.stack([
        x[:, 0:2 * Ho:2, 0:2 * Wo:2, :],
        x[:, 0:2 * Ho:2, 1:2 * Wo:2, :],
        x[:, 1:2 * Ho:2, 0:2 * Wo:2, :],
        x[:, 1:2 * Ho:2, 1:2 * Wo:2, :],
    ], axis=0)
    M = B * Ho * Wo
    p = taps.reshape(4, M, C)

    # Tile over M so the kernel scales with batch (stays under scoped VMEM
    # limits and keeps DMA/compute overlap); one block at small batch.
    nb = max(1, _cdiv(M, 2048))
    tm = _round_up(_cdiv(M, nb), 8)
    Mp = nb * tm
    if Mp != M:
        p = jnp.pad(p, ((0, 0), (0, Mp - M), (0, 0)))

    out = pl.pallas_call(
        _maxpool_kernel,
        out_shape=jax.ShapeDtypeStruct((Mp, C), x.dtype),
        grid_spec=pltpu.PrefetchScalarGridSpec(
            num_scalar_prefetch=0,
            grid=(nb,),
            in_specs=[pl.BlockSpec((4, tm, C), lambda m: (0, m, 0))],
            out_specs=pl.BlockSpec((tm, C), lambda m: (m, 0)),
        ),
        compiler_params=pltpu.CompilerParams(dimension_semantics=("parallel",)),
    )(p)
    return out[:M].reshape(B, Ho, Wo, C)


# ---------------------------------------------------------------------------
# Parameters (synthetic, deterministic).  Weights padded + cast to bf16 once.
# ---------------------------------------------------------------------------
_RNG = np.random.RandomState(0)
_BN_EPS = 1e-5  # PyTorch BatchNorm2d default

# Geometry implied by feat_dim = 12800 (32x32 single-channel input).
_HIN = 32
_WP1 = _HIN + 2        # padded width for conv1 (padding=1) -> 34
_HO1 = _WP1 - 7 + 1    # conv1 output size -> 28
_HO2 = (_HO1 // 2) - 5 + 1   # conv2 output size -> 10
_C1PAD = 128           # conv1 carries 128 channels (64 real + 64 zero)


def _pack(w, scale, bias):
    """Pad (K,N) weight to lane/sublane-dense (Kp,Np) multiples of 128, bf16."""
    K, N = w.shape
    Kp = _round_up(K, 128)
    Np = _round_up(N, 128)
    w_p = np.zeros((Kp, Np), np.float32); w_p[:K, :N] = w
    s_p = np.zeros((1, Np), np.float32);  s_p[0, :N] = scale
    b_p = np.zeros((1, Np), np.float32);  b_p[0, :N] = bias
    return (jnp.asarray(w_p, dtype=jnp.bfloat16),
            jnp.asarray(s_p), jnp.asarray(b_p))


def _bn_fold(conv_b, cout):
    """Folded BatchNorm (inference semantics) -> per-channel scale/bias."""
    gamma = (1.0 + 0.05 * _RNG.randn(cout)).astype(np.float32)
    beta = (0.05 * _RNG.randn(cout)).astype(np.float32)
    mean = (0.05 * _RNG.randn(cout)).astype(np.float32)
    var = (1.0 + 0.05 * _RNG.rand(cout)).astype(np.float32)
    # TODO(synk): BatchNorm is folded with running stats (eval semantics);
    # training-mode batch statistics are not modeled.
    scale = gamma / np.sqrt(var + _BN_EPS)
    bias = (conv_b - mean) * scale + beta
    return scale, bias


def _conv1_band_params():
    """Conv2d(1,64,7,s=1,p=1)+BN as a banded matmul.

    A[b*28+i, di*34+w] = x_pad[b, i+di, w]  (built in forward from row slices)
    Wband[di*34+w, j*128+co] = w[di, w-j, co]  for 0 <= w-j < 7, else 0.
    Output column (j, co) -> NHWC conv1 activation, 128-channel padded.
    """
    k, cout = 7, 64
    fan_in = k * k * 1
    w = (_RNG.randn(k, k, 1, cout) * np.sqrt(2.0 / fan_in)).astype(np.float32)
    conv_b = (0.05 * _RNG.randn(cout)).astype(np.float32)
    scale, bias = _bn_fold(conv_b, cout)
    w = w[:, :, 0, :]                                   # (7, 7, 64): (di, dj, co)

    K = k * _WP1                                        # 238
    N = _HO1 * _C1PAD                                   # 3584
    wb = np.zeros((K, N), np.float32)
    for di in range(k):
        for j in range(_HO1):
            # rows di*34 + (j .. j+6), cols j*128 + (0..63)
            wb[di * _WP1 + j: di * _WP1 + j + k, j * _C1PAD: j * _C1PAD + cout] = w[di]
    s_full = np.zeros(N, np.float32)
    b_full = np.zeros(N, np.float32)
    for j in range(_HO1):
        s_full[j * _C1PAD: j * _C1PAD + cout] = scale
        b_full[j * _C1PAD: j * _C1PAD + cout] = bias
    return _pack(wb, s_full, b_full)


def _conv2_params():
    """Conv2d(64,128,5,s=1)+BN; input-channel rows padded to 128 (zeros)."""
    k, cin, cout = 5, 64, 128
    fan_in = k * k * cin
    w = (_RNG.randn(k, k, cin, cout) * np.sqrt(2.0 / fan_in)).astype(np.float32)
    conv_b = (0.05 * _RNG.randn(cout)).astype(np.float32)
    scale, bias = _bn_fold(conv_b, cout)
    w_full = np.zeros((k, k, _C1PAD, cout), np.float32)
    w_full[:, :, :cin, :] = w                          # rows ordered (di, dj, c)
    w_full = w_full.reshape(k * k * _C1PAD, cout)      # K = 3200
    return _pack(w_full, scale, bias)


def _fc_params(n_classes):
    """Linear(12800, n_classes); rows pre-permuted from NCHW to NHWC order."""
    c2, ho = 128, _HO2
    feat_dim = c2 * ho * ho                            # 12800
    fw = (_RNG.randn(feat_dim, n_classes) * np.sqrt(1.0 / feat_dim)).astype(np.float32)
    fb = (0.01 * _RNG.randn(n_classes)).astype(np.float32)
    # fw rows are in NCHW (c,h,w) order (matches the returned feature.view);
    # permute to NHWC (h,w,c) so the kernel consumes the NHWC conv2 output.
    fw_nhwc = fw.reshape(c2, ho, ho, n_classes).transpose(1, 2, 0, 3)
    fw_nhwc = fw_nhwc.reshape(feat_dim, n_classes)
    return _pack(fw_nhwc, np.ones(n_classes, np.float32), fb)


def build_params(n_classes):
    p = {}
    p["conv1"] = _conv1_band_params()   # Conv2d(1, 64, 7, s=1, p=1) + BN (banded)
    p["conv2"] = _conv2_params()        # Conv2d(64, 128, 5, s=1)    + BN
    p["fc"] = _fc_params(n_classes)     # Linear(12800, n_classes), NHWC rows
    p["n_classes"] = n_classes
    return p


# ---------------------------------------------------------------------------
# Forward pass (matches MCNN2.forward, inference semantics)
# ---------------------------------------------------------------------------
def forward(params, x_nchw):
    B, Cin, H, W = x_nchw.shape
    assert Cin == 1 and H == _HIN and W == _HIN, "MCNN2 expects (B,1,32,32)"

    # ---- Conv2d(1,64,7,s=1,p=1) + BN + LeakyReLU(0.2) as one banded matmul.
    x = x_nchw[:, 0, :, :].astype(jnp.float32)                 # (B, 32, 32)
    xp = jnp.pad(x, ((0, 0), (1, 1), (1, 1)))                  # (B, 34, 34)
    # A[b*28+i, di*34+w] = xp[b, i+di, w]: 7 contiguous row slices + 1 concat.
    a1 = jnp.concatenate([xp[:, di:di + _HO1, :] for di in range(7)], axis=-1)
    a1 = a1.reshape(B * _HO1, 7 * _WP1)                        # (B*28, 238)
    w_p, s_p, b_p = params["conv1"]
    y = matmul_fused(a1, w_p, s_p, b_p, _HO1 * _C1PAD,
                     act="leaky_relu", out_dtype=jnp.bfloat16)
    y = y.reshape(B, _HO1, _HO1, _C1PAD)                       # NHWC bf16, C=128 (64 real)

    # ---- MaxPool2d(2, 2)
    y = maxpool2x2(y)                                          # (B, 14, 14, 128) bf16

    # ---- Conv2d(64,128,5,s=1) + BN + LeakyReLU(0.2): lane-dense im2col + matmul.
    taps = [y[:, di:di + _HO2, dj:dj + _HO2, :]
            for di in range(5) for dj in range(5)]
    a2 = jnp.concatenate(taps, axis=-1).reshape(B * _HO2 * _HO2, 25 * _C1PAD)
    w_p, s_p, b_p = params["conv2"]
    z = matmul_fused(a2, w_p, s_p, b_p, 128, act="leaky_relu",
                     out_dtype=jnp.float32)
    z = z.reshape(B, _HO2, _HO2, 128)                          # NHWC f32

    # ---- Linear(12800, num_classes): consumes NHWC flatten (weight rows permuted).
    w_p, s_p, b_p = params["fc"]
    out = matmul_fused(z.reshape(B, -1), w_p, s_p, b_p,
                       params["n_classes"], act=None)

    # Returned feature is the NCHW flatten, exactly like feature.view(B, -1).
    feature = jnp.transpose(z, (0, 3, 1, 2)).reshape(B, -1)    # (B, 12800)
    return feature, out


if __name__ == "__main__":
    n_classes = 10
    params = build_params(n_classes)

    key = jax.random.PRNGKey(0)
    # 32x32 single-channel input is the size implied by feat_dim=12800:
    # (32+2-7+1)=28 -> pool -> 14 -> (14-5+1)=10, 128*10*10 = 12800.
    x = jax.random.normal(key, (2, 1, 32, 32), dtype=jnp.float32)

    fwd = jax.jit(functools.partial(forward, params))
    feature, out = fwd(x)
    jax.block_until_ready((feature, out))

    assert feature.shape == (2, 12800), feature.shape
    assert out.shape == (2, n_classes), out.shape
    assert bool(jnp.all(jnp.isfinite(feature))) and bool(jnp.all(jnp.isfinite(out)))
    print("KERNEL_OK")
</pallas_src>

<mosaic_0001>
module attributes {stable_mosaic.version = 11 : i64} {
  func.func @_mm_kernel(%arg0: i32, %arg1: i32, %arg2: memref<64x256xbf16, #tpu.memory_space<vmem>>, %arg3: memref<256x512xbf16, #tpu.memory_space<vmem>>, %arg4: memref<1x512xf32, #tpu.memory_space<vmem>>, %arg5: memref<1x512xf32, #tpu.memory_space<vmem>>, %arg6: memref<64x512xbf16, #tpu.memory_space<vmem>>) attributes {dimension_semantics = [#tpu.dimension_semantics<parallel>, #tpu.dimension_semantics<parallel>], iteration_bounds = array<i64: 1, 7>, scalar_prefetch = 0 : i64, scratch_operands = 0 : i64, tpu.core_type = #tpu.core_type<tc>, window_params = [{transform_indices = @transform_0, window_bounds = array<i64: 64, 256>}, {transform_indices = @transform_1, window_bounds = array<i64: 256, 512>}, {transform_indices = @transform_2, window_bounds = array<i64: 1, 512>}, {transform_indices = @transform_3, window_bounds = array<i64: 1, 512>}, {transform_indices = @transform_4, window_bounds = array<i64: 64, 512>}]} {
    %c0 = arith.constant 0 : index
    %c0_0 = arith.constant 0 : index
    %0 = vector.load %arg2[%c0, %c0_0] : memref<64x256xbf16, #tpu.memory_space<vmem>>, vector<64x256xbf16>
    %c0_1 = arith.constant 0 : index
    %c0_2 = arith.constant 0 : index
    %1 = vector.load %arg3[%c0_1, %c0_2] : memref<256x512xbf16, #tpu.memory_space<vmem>>, vector<256x512xbf16>
    %cst = arith.constant dense<0.000000e+00> : vector<64x512xf32>
    %2 = tpu.matmul %0, %1, %cst {dimension_numbers = #tpu.dot_dimension_numbers<[1], [0], [0], [1], [0, 0, 1, 1], [], []>} : vector<64x256xbf16>, vector<256x512xbf16>, vector<64x512xf32> -> vector<64x512xf32>
    %c0_3 = arith.constant 0 : index
    %c0_4 = arith.constant 0 : index
    %3 = vector.load %arg4[%c0_3, %c0_4] : memref<1x512xf32, #tpu.memory_space<vmem>>, vector<1x512xf32>
    %4 = vector.broadcast %3 : vector<1x512xf32> to vector<64x512xf32>
    %5 = arith.mulf %2, %4 : vector<64x512xf32>
    %c0_5 = arith.constant 0 : index
    %c0_6 = arith.constant 0 : index
    %6 = vector.load %arg5[%c0_5, %c0_6] : memref<1x512xf32, #tpu.memory_space<vmem>>, vector<1x512xf32>
    %7 = vector.broadcast %6 : vector<1x512xf32> to vector<64x512xf32>
    %8 = arith.addf %5, %7 : vector<64x512xf32>
    %cst_7 = arith.constant 2.000000e-01 : f32
    %9 = vector.broadcast %cst_7 : f32 to vector<64x512xf32>
    %10 = arith.mulf %9, %8 : vector<64x512xf32>
    %11 = arith.maximumf %8, %10 : vector<64x512xf32>
    %12 = arith.truncf %11 : vector<64x512xf32> to vector<64x512xbf16>
    %c0_8 = arith.constant 0 : index
    %c0_9 = arith.constant 0 : index
    %13 = vector.load %arg6[%c0_8, %c0_9] : memref<64x512xbf16, #tpu.memory_space<vmem>>, vector<64x512xbf16>
    tpu.vector_store %arg6[%c0_8, %c0_9], %12 {strides = array<i32>} : memref<64x512xbf16, #tpu.memory_space<vmem>>, vector<64x512xbf16>,
    return
  }
  func.func @transform_0(%arg0: i32, %arg1: i32) -> (i32, i32) {
    %c0_i32 = arith.constant 0 : i32
    %c0_i32_0 = arith.constant 0 : i32
    return %arg0, %c0_i32 : i32, i32
  }
  func.func @transform_1(%arg0: i32, %arg1: i32) -> (i32, i32) {
    %c0_i32 = arith.constant 0 : i32
    %c0_i32_0 = arith.constant 0 : i32
    return %c0_i32, %arg1 : i32, i32
  }
  func.func @transform_2(%arg0: i32, %arg1: i32) -> (i32, i32) {
    %c0_i32 = arith.constant 0 : i32
    %c0_i32_0 = arith.constant 0 : i32
    return %c0_i32, %arg1 : i32, i32
  }
  func.func @transform_3(%arg0: i32, %arg1: i32) -> (i32, i32) {
    %c0_i32 = arith.constant 0 : i32
    %c0_i32_0 = arith.constant 0 : i32
    return %c0_i32, %arg1 : i32, i32
  }
  func.func @transform_4(%arg0: i32, %arg1: i32) -> (i32, i32) {
    %c0_i32 = arith.constant 0 : i32
    return %arg0, %arg1 : i32, i32
  }
}

module attributes {stable_mosaic.version = 11 : i64} {
  func.func @_maxpool_kernel(%arg0: i32, %arg1: memref<4x392x128xbf16, #tpu.memory_space<vmem>>, %arg2: memref<392x128xbf16, #tpu.memory_space<vmem>>) attributes {dimension_semantics = [#tpu.dimension_semantics<parallel>], iteration_bounds = array<i64: 1>, scalar_prefetch = 0 : i64, scratch_operands = 0 : i64, tpu.core_type = #tpu.core_type<tc>, window_params = [{transform_indices = @transform_0, window_bounds = array<i64: 4, 392, 128>}, {transform_indices = @transform_1, window_bounds = array<i64: 392, 128>}]} {
    %c0 = arith.constant 0 : index
    %c0_0 = arith.constant 0 : index
    %c0_1 = arith.constant 0 : index
    %0 = vector.load %arg1[%c0, %c0_0, %c0_1] : memref<4x392x128xbf16, #tpu.memory_space<vmem>>, vector<1x392x128xbf16>
    %1 = vector.shape_cast %0 : vector<1x392x128xbf16> to vector<392x128xbf16>
    %c1 = arith.constant 1 : index
    %c0_2 = arith.constant 0 : index
    %c0_3 = arith.constant 0 : index
    %2 = vector.load %arg1[%c1, %c0_2, %c0_3] : memref<4x392x128xbf16, #tpu.memory_space<vmem>>, vector<1x392x128xbf16>
    %3 = vector.shape_cast %2 : vector<1x392x128xbf16> to vector<392x128xbf16>
    %4 = arith.maximumf %1, %3 : vector<392x128xbf16>
    %c2 = arith.constant 2 : index
    %c0_4 = arith.constant 0 : index
    %c0_5 = arith.constant 0 : index
    %5 = vector.load %arg1[%c2, %c0_4, %c0_5] : memref<4x392x128xbf16, #tpu.memory_space<vmem>>, vector<1x392x128xbf16>
    %6 = vector.shape_cast %5 : vector<1x392x128xbf16> to vector<392x128xbf16>
    %c3 = arith.constant 3 : index
    %c0_6 = arith.constant 0 : index
    %c0_7 = arith.constant 0 : index
    %7 = vector.load %arg1[%c3, %c0_6, %c0_7] : memref<4x392x128xbf16, #tpu.memory_space<vmem>>, vector<1x392x128xbf16>
    %8 = vector.shape_cast %7 : vector<1x392x128xbf16> to vector<392x128xbf16>
    %9 = arith.maximumf %6, %8 : vector<392x128xbf16>
    %10 = arith.maximumf %4, %9 : vector<392x128xbf16>
    %c0_8 = arith.constant 0 : index
    %c0_9 = arith.constant 0 : index
    %11 = vector.load %arg2[%c0_8, %c0_9] : memref<392x128xbf16, #tpu.memory_space<vmem>>, vector<392x128xbf16>
    tpu.vector_store %arg2[%c0_8, %c0_9], %10 {strides = array<i32>} : memref<392x128xbf16, #tpu.memory_space<vmem>>, vector<392x128xbf16>,
    return
  }
  func.func @transform_0(%arg0: i32) -> (i32, i32, i32) {
    %c0_i32 = arith.constant 0 : i32
    %c0_i32_0 = arith.constant 0 : i32
    %c0_i32_1 = arith.constant 0 : i32
    return %c0_i32, %arg0, %c0_i32_0 : i32, i32, i32
  }
  func.func @transform_1(%arg0: i32) -> (i32, i32) {
    %c0_i32 = arith.constant 0 : i32
    %c0_i32_0 = arith.constant 0 : i32
    return %arg0, %c0_i32 : i32, i32
  }
}

module attributes {stable_mosaic.version = 11 : i64} {
  func.func @_mm_kernel(%arg0: i32, %arg1: i32, %arg2: memref<208x3200xbf16, #tpu.memory_space<vmem>>, %arg3: memref<3200x128xbf16, #tpu.memory_space<vmem>>, %arg4: memref<1x128xf32, #tpu.memory_space<vmem>>, %arg5: memref<1x128xf32, #tpu.memory_space<vmem>>, %arg6: memref<208x128xf32, #tpu.memory_space<vmem>>) attributes {dimension_semantics = [#tpu.dimension_semantics<parallel>, #tpu.dimension_semantics<parallel>], iteration_bounds = array<i64: 1, 1>, scalar_prefetch = 0 : i64, scratch_operands = 0 : i64, tpu.core_type = #tpu.core_type<tc>, window_params = [{transform_indices = @transform_0, window_bounds = array<i64: 208, 3200>}, {transform_indices = @transform_1, window_bounds = array<i64: 3200, 128>}, {transform_indices = @transform_2, window_bounds = array<i64: 1, 128>}, {transform_indices = @transform_3, window_bounds = array<i64: 1, 128>}, {transform_indices = @transform_4, window_bounds = array<i64: 208, 128>}]} {
    %c0 = arith.constant 0 : index
    %c0_0 = arith.constant 0 : index
    %0 = vector.load %arg2[%c0, %c0_0] : memref<208x3200xbf16, #tpu.memory_space<vmem>>, vector<208x3200xbf16>
    %c0_1 = arith.constant 0 : index
    %c0_2 = arith.constant 0 : index
    %1 = vector.load %arg3[%c0_1, %c0_2] : memref<3200x128xbf16, #tpu.memory_space<vmem>>, vector<3200x128xbf16>
    %cst = arith.constant dense<0.000000e+00> : vector<208x128xf32>
    %2 = tpu.matmul %0, %1, %cst {dimension_numbers = #tpu.dot_dimension_numbers<[1], [0], [0], [1], [0, 0, 1, 1], [], []>} : vector<208x3200xbf16>, vector<3200x128xbf16>, vector<208x128xf32> -> vector<208x128xf32>
    %c0_3 = arith.constant 0 : index
    %c0_4 = arith.constant 0 : index
    %3 = vector.load %arg4[%c0_3, %c0_4] : memref<1x128xf32, #tpu.memory_space<vmem>>, vector<1x128xf32>
    %4 = vector.broadcast %3 : vector<1x128xf32> to vector<208x128xf32>
    %5 = arith.mulf %2, %4 : vector<208x128xf32>
    %c0_5 = arith.constant 0 : index
    %c0_6 = arith.constant 0 : index
    %6 = vector.load %arg5[%c0_5, %c0_6] : memref<1x128xf32, #tpu.memory_space<vmem>>, vector<1x128xf32>
    %7 = vector.broadcast %6 : vector<1x128xf32> to vector<208x128xf32>
    %8 = arith.addf %5, %7 : vector<208x128xf32>
    %cst_7 = arith.constant 2.000000e-01 : f32
    %9 = vector.broadcast %cst_7 : f32 to vector<208x128xf32>
    %10 = arith.mulf %9, %8 : vector<208x128xf32>
    %11 = arith.maximumf %8, %10 : vector<208x128xf32>
    %c0_8 = arith.constant 0 : index
    %c0_9 = arith.constant 0 : index
    %12 = vector.load %arg6[%c0_8, %c0_9] : memref<208x128xf32, #tpu.memory_space<vmem>>, vector<208x128xf32>
    tpu.vector_store %arg6[%c0_8, %c0_9], %11 {strides = array<i32>} : memref<208x128xf32, #tpu.memory_space<vmem>>, vector<208x128xf32>,
    return
  }
  func.func @transform_0(%arg0: i32, %arg1: i32) -> (i32, i32) {
    %c0_i32 = arith.constant 0 : i32
    %c0_i32_0 = arith.constant 0 : i32
    return %arg0, %c0_i32 : i32, i32
  }
  func.func @transform_1(%arg0: i32, %arg1: i32) -> (i32, i32) {
    %c0_i32 = arith.constant 0 : i32
    %c0_i32_0 = arith.constant 0 : i32
    return %c0_i32, %arg1 : i32, i32
  }
  func.func @transform_2(%arg0: i32, %arg1: i32) -> (i32, i32) {
    %c0_i32 = arith.constant 0 : i32
    %c0_i32_0 = arith.constant 0 : i32
    return %c0_i32, %arg1 : i32, i32
  }
  func.func @transform_3(%arg0: i32, %arg1: i32) -> (i32, i32) {
    %c0_i32 = arith.constant 0 : i32
    %c0_i32_0 = arith.constant 0 : i32
    return %c0_i32, %arg1 : i32, i32
  }
  func.func @transform_4(%arg0: i32, %arg1: i32) -> (i32, i32) {
    %c0_i32 = arith.constant 0 : i32
    return %arg0, %arg1 : i32, i32
  }
}

module attributes {stable_mosaic.version = 11 : i64} {
  func.func @_mm_kernel(%arg0: i32, %arg1: i32, %arg2: memref<16x12800xbf16, #tpu.memory_space<vmem>>, %arg3: memref<12800x128xbf16, #tpu.memory_space<vmem>>, %arg4: memref<1x128xf32, #tpu.memory_space<vmem>>, %arg5: memref<1x128xf32, #tpu.memory_space<vmem>>, %arg6: memref<16x128xf32, #tpu.memory_space<vmem>>) attributes {dimension_semantics = [#tpu.dimension_semantics<parallel>, #tpu.dimension_semantics<parallel>], iteration_bounds = array<i64: 1, 1>, scalar_prefetch = 0 : i64, scratch_operands = 0 : i64, tpu.core_type = #tpu.core_type<tc>, window_params = [{transform_indices = @transform_0, window_bounds = array<i64: 16, 12800>}, {transform_indices = @transform_1, window_bounds = array<i64: 12800, 128>}, {transform_indices = @transform_2, window_bounds = array<i64: 1, 128>}, {transform_indices = @transform_3, window_bounds = array<i64: 1, 128>}, {transform_indices = @transform_4, window_bounds = array<i64: 16, 128>}]} {
    %c0 = arith.constant 0 : index
    %c0_0 = arith.constant 0 : index
    %0 = vector.load %arg2[%c0, %c0_0] : memref<16x12800xbf16, #tpu.memory_space<vmem>>, vector<16x12800xbf16>
    %c0_1 = arith.constant 0 : index
    %c0_2 = arith.constant 0 : index
    %1 = vector.load %arg3[%c0_1, %c0_2] : memref<12800x128xbf16, #tpu.memory_space<vmem>>, vector<12800x128xbf16>
    %cst = arith.constant dense<0.000000e+00> : vector<16x128xf32>
    %2 = tpu.matmul %0, %1, %cst {dimension_numbers = #tpu.dot_dimension_numbers<[1], [0], [0], [1], [0, 0, 1, 1], [], []>} : vector<16x12800xbf16>, vector<12800x128xbf16>, vector<16x128xf32> -> vector<16x128xf32>
    %c0_3 = arith.constant 0 : index
    %c0_4 = arith.constant 0 : index
    %3 = vector.load %arg4[%c0_3, %c0_4] : memref<1x128xf32, #tpu.memory_space<vmem>>, vector<1x128xf32>
    %4 = vector.broadcast %3 : vector<1x128xf32> to vector<16x128xf32>
    %5 = arith.mulf %2, %4 : vector<16x128xf32>
    %c0_5 = arith.constant 0 : index
    %c0_6 = arith.constant 0 : index
    %6 = vector.load %arg5[%c0_5, %c0_6] : memref<1x128xf32, #tpu.memory_space<vmem>>, vector<1x128xf32>
    %7 = vector.broadcast %6 : vector<1x128xf32> to vector<16x128xf32>
    %8 = arith.addf %5, %7 : vector<16x128xf32>
    %c0_7 = arith.constant 0 : index
    %c0_8 = arith.constant 0 : index
    %9 = vector.load %arg6[%c0_7, %c0_8] : memref<16x128xf32, #tpu.memory_space<vmem>>, vector<16x128xf32>
    tpu.vector_store %arg6[%c0_7, %c0_8], %8 {strides = array<i32>} : memref<16x128xf32, #tpu.memory_space<vmem>>, vector<16x128xf32>,
    return
  }
  func.func @transform_0(%arg0: i32, %arg1: i32) -> (i32, i32) {
    %c0_i32 = arith.constant 0 : i32
    %c0_i32_0 = arith.constant 0 : i32
    return %arg0, %c0_i32 : i32, i32
  }
  func.func @transform_1(%arg0: i32, %arg1: i32) -> (i32, i32) {
    %c0_i32 = arith.constant 0 : i32
    %c0_i32_0 = arith.constant 0 : i32
    return %c0_i32, %arg1 : i32, i32
  }
  func.func @transform_2(%arg0: i32, %arg1: i32) -> (i32, i32) {
    %c0_i32 = arith.constant 0 : i32
    %c0_i32_0 = arith.constant 0 : i32
    return %c0_i32, %arg1 : i32, i32
  }
  func.func @transform_3(%arg0: i32, %arg1: i32) -> (i32, i32) {
    %c0_i32 = arith.constant 0 : i32
    %c0_i32_0 = arith.constant 0 : i32
    return %c0_i32, %arg1 : i32, i32
  }
  func.func @transform_4(%arg0: i32, %arg1: i32) -> (i32, i32) {
    %c0_i32 = arith.constant 0 : i32
    return %arg0, %arg1 : i32, i32
  }
}

</mosaic_0001>

<llo_original>
// kernel: forward.4
$region0: #{forward.4}
  #allocation0 [shape = 'u32[]', space=smem, size = 0x4, offset = 0x4, fixed_abs, tag = 'smem constant byte address 0x4 - core index']
  #allocation1 [shape = 'u32[72,128]{1,0:T(1,128)}', space=vmem, size = 0x9000, scoped, tag = 'internal scratch']
  %s0 = inlined_call_operand.vmem [shape: bf16[64,256], index: 0, kind: input, shape index: {}]
  %s1 = inlined_call_operand.hbm [shape: bf16[256,3584], index: 1, kind: input, shape index: {}]
  %s2 = inlined_call_operand.hbm [shape: f32[1,3584], index: 2, kind: input, shape index: {}]
  %s3 = inlined_call_operand.hbm [shape: f32[1,3584], index: 3, kind: input, shape index: {}]
  %s4 = inlined_call_operand.vmem [shape: bf16[64,3584], index: 4, kind: output, shape index: {}]
  %s5 = sld [smem:[#allocation0]]
  $region80: #{forward.4} parent=0
    _
  %s7 = ssub.s32 1, %s5
  %s8 = scalar_select 0, %s7, %s5
  $region1: #{forward.4} parent=0
    #allocation2 [shape = 'u8[524288]{0}', space=vmem, size = 0x80000, scoped, tag = 'input window, operand 1']
    #allocation3 [shape = 's32[2]{0}', space=sflag, size = 0x8, scoped, tag = 'scoped memory for forward.4']
    #allocation4 [shape = 'u8[4096]{0}', space=vmem, size = 0x1000, scoped, tag = 'input window, operand 2']
    #allocation5 [shape = 's32[2]{0}', space=sflag, size = 0x8, scoped, tag = 'scoped memory for forward.4']
    #allocation6 [shape = 'u8[4096]{0}', space=vmem, size = 0x1000, scoped, tag = 'input window, operand 3']
    #allocation7 [shape = 'u8[131072]{0}', space=vmem, size = 0x20000, scoped, tag = 'output window, operand 0']
    %9 = vsyncpa [#allocation3], 0
    %s10 = scalar_lea.sflag [#allocation3], 1
    %11 = vsyncpa %s10, 0
    %12 = vsyncpa [#allocation5], 0
    %s13 = scalar_lea.sflag [#allocation5], 1
    %14 = vsyncpa %s13, 0
    loop: start=0, step=1, limit=9
    $region2: #{forward.4} parent=1 // loop_pre_header
      _
    $region3: #{forward.4} parent=1 // loop_header
      %s16 = sphi 0, %s20
      %p17 = scmp.ge.s32.totalorder %s16, 9
      %s23 = sphi 0, %s35
      %s24 = sphi 0, %s31
      %s25 = sphi 0, %s23
      %s26 = sphi 0, %s24
      %s27 = sphi 0, %s25
      %s28 = sphi 0, %s26
      %s38 = sphi 0, %s40
      %s41 = sphi 0, %s38
      %s42 = sphi 0, %s41
      %s58 = sphi 0, %s42
      %s64 = sphi 0, %s66
      %s67 = sphi 0, %s64
      %s68 = sphi 0, %s67
      %s84 = sphi 0, %s68
      %s90 = sphi 0, %s92
      %s93 = sphi 0, %s90
      %s94 = sphi 0, %s93
      %s110 = sphi 0, %s94
      %s116 = sphi 0, %s118
      %s119 = sphi 0, %s116
      %s120 = sphi 0, %s119
      %s136 = sphi 0, %s120
      %s144 = sphi 0, %s146
      %s147 = sphi 0, %s144
      %s148 = sphi 0, %s147
      %s164 = sphi 0, %s148
    $region4: #{forward.4} parent=1 // loop_header_branch
      %19 = sbr.rel (%p17) target = $region8
    $region5: #{forward.4} parent=1 // loop_body
      %s21 = ssub.s32 %s16, 1
      %s22 = ssub.s32 %s16, 2
      %s29 = sadd.s32 1, %s24
      %p30 = scmp.ge.s32.totalorder %s29, 7
      %s31 = scalar_select %p30, 0, %s29
      %s32 = sadd.s32 1, %s23
      %s33 = scalar_select %p30, %s32, %s23
      %p34 = scmp.ge.s32.totalorder %s33, 1
      %s35 = scalar_select %p34, 0, %s33
      %s36 = ssub.s32 %s23, %s35
      %p37 = scmp.eq.s32.totalorder %s36, 0
      %s39 = sadd.s32 %s38, 1
      %s40 = scalar_select %p37, %s38, %s39
      %p43 = pneg %p37
      %p44 = scmp.eq.s32.totalorder %s16, 6
      %p45 = por %p43, %p44
      %p46 = scmp.ne.s32.totalorder %s38, %s41
      %p47 = scmp.eq.s32.totalorder %s16, 0
      %p48 = por %p46, %p47
      %p49 = scmp.ne.s32.totalorder %s38, %s41
      %p50 = scmp.eq.s32.totalorder %s21, 6
      %p51 = por %p49, %p50
      %p52 = scmp.ne.s32.totalorder %s41, %s42
      %p53 = scmp.eq.s32.totalorder %s21, 0
      %p54 = por %p52, %p53
      %p55 = scmp.ne.s32.totalorder %s41, %s42
      %p56 = scmp.eq.s32.totalorder %s22, 6
      %p57 = por %p55, %p56
      %p59 = scmp.ne.s32.totalorder %s42, %s58
      %p60 = scmp.eq.s32.totalorder %s22, 0
      %p61 = por %p59, %p60
      %s62 = ssub.s32 %s24, %s31
      %p63 = scmp.eq.s32.totalorder %s62, 0
      %s65 = sadd.s32 %s64, 1
      %s66 = scalar_select %p63, %s64, %s65
      %p69 = pneg %p63
      %p70 = scmp.eq.s32.totalorder %s16, 6
      %p71 = por %p69, %p70
      %p72 = scmp.ne.s32.totalorder %s64, %s67
      %p73 = scmp.eq.s32.totalorder %s16, 0
      %p74 = por %p72, %p73
      %p75 = scmp.ne.s32.totalorder %s64, %s67
      %p76 = scmp.eq.s32.totalorder %s21, 6
      %p77 = por %p75, %p76
      %p78 = scmp.ne.s32.totalorder %s67, %s68
      %p79 = scmp.eq.s32.totalorder %s21, 0
      %p80 = por %p78, %p79
      %p81 = scmp.ne.s32.totalorder %s67, %s68
      %p82 = scmp.eq.s32.totalorder %s22, 6
      %p83 = por %p81, %p82
      %p85 = scmp.ne.s32.totalorder %s68, %s84
      %p86 = scmp.eq.s32.totalorder %s22, 0
      %p87 = por %p85, %p86
      %s88 = ssub.s32 %s24, %s31
      %p89 = scmp.eq.s32.totalorder %s88, 0
      %s91 = sadd.s32 %s90, 1
      %s92 = scalar_select %p89, %s90, %s91
      %p95 = pneg %p89
      %p96 = scmp.eq.s32.totalorder %s16, 6
      %p97 = por %p95, %p96
      %p98 = scmp.ne.s32.totalorder %s90, %s93
      %p99 = scmp.eq.s32.totalorder %s16, 0
      %p100 = por %p98, %p99
      %p101 = scmp.ne.s32.totalorder %s90, %s93
      %p102 = scmp.eq.s32.totalorder %s21, 6
      %p103 = por %p101, %p102
      %p104 = scmp.ne.s32.totalorder %s93, %s94
      %p105 = scmp.eq.s32.totalorder %s21, 0
      %p106 = por %p104, %p105
      %p107 = scmp.ne.s32.totalorder %s93, %s94
      %p108 = scmp.eq.s32.totalorder %s22, 6
      %p109 = por %p107, %p108
      %p111 = scmp.ne.s32.totalorder %s94, %s110
      %p112 = scmp.eq.s32.totalorder %s22, 0
      %p113 = por %p111, %p112
      %s114 = ssub.s32 %s24, %s31
      %p115 = scmp.eq.s32.totalorder %s114, 0
      %s117 = sadd.s32 %s116, 1
      %s118 = scalar_select %p115, %s116, %s117
      %p121 = pneg %p115
      %p122 = scmp.eq.s32.totalorder %s16, 6
      %p123 = por %p121, %p122
      %p124 = scmp.ne.s32.totalorder %s116, %s119
      %p125 = scmp.eq.s32.totalorder %s16, 0
      %p126 = por %p124, %p125
      %p127 = scmp.ne.s32.totalorder %s116, %s119
      %p128 = scmp.eq.s32.totalorder %s21, 6
      %p129 = por %p127, %p128
      %p130 = scmp.ne.s32.totalorder %s119, %s120
      %p131 = scmp.eq.s32.totalorder %s21, 0
      %p132 = por %p130, %p131
      %p133 = scmp.ne.s32.totalorder %s119, %s120
      %p134 = scmp.eq.s32.totalorder %s22, 6
      %p135 = por %p133, %p134
      %p137 = scmp.ne.s32.totalorder %s120, %s136
      %p138 = scmp.eq.s32.totalorder %s22, 0
      %p139 = por %p137, %p138
      %s140 = ssub.s32 %s23, %s35
      %s141 = ssub.s32 %s24, %s31
      %s142 = sor.u32 %s140, %s141
      %p143 = scmp.eq.s32.totalorder %s142, 0
      %s145 = sadd.s32 %s144, 1
      %s146 = scalar_select %p143, %s144, %s145
      %p149 = pneg %p143
      %p150 = scmp.eq.s32.totalorder %s16, 6
      %p151 = por %p149, %p150
      %p152 = scmp.ne.s32.totalorder %s144, %s147
      %p153 = scmp.eq.s32.totalorder %s16, 0
      %p154 = por %p152, %p153
      %p155 = scmp.ne.s32.totalorder %s144, %s147
      %p156 = scmp.eq.s32.totalorder %s21, 6
      %p157 = por %p155, %p156
      %p158 = scmp.ne.s32.totalorder %s147, %s148
      %p159 = scmp.eq.s32.totalorder %s21, 0
      %p160 = por %p158, %p159
      %p161 = scmp.ne.s32.totalorder %s147, %s148
      %p162 = scmp.eq.s32.totalorder %s22, 6
      %p163 = por %p161, %p162
      %p165 = scmp.ne.s32.totalorder %s148, %s164
      %p166 = scmp.eq.s32.totalorder %s22, 0
      %p167 = por %p165, %p166
      %p168 = scmp.le.s32.totalorder 1, %s16
      %p169 = scmp.lt.s32.totalorder %s16, 8
      %p170 = pnand %p168, %p169
      %p171 = pneg %p170
      // Predicated region
      $region9: #{forward.4} parent=5 // pred_check
        _
      $region10: #{forward.4} parent=5 // pred_check_branch
        %173 = sbr.rel (%p170) target = $region12
      $region11: #{forward.4} parent=5 // pred_region
        %s174 = ssub.s32 %s16, 1
        // Predicated region
        $region13: #{forward.4} parent=11 // pred_check
          %p175 = pneg %p54
        $region14: #{forward.4} parent=11 // pred_check_branch
          %177 = sbr.rel (%p175) target = $region16
        $region15: #{forward.4} parent=11 // pred_region
          %s178 = smul.u32 8, %s25
          %p179 = scmp.lt.s32.totalorder %s178, 7
          %s180 = scalar_select %p179, %s178, 7
          %s181 = smul.addr %s180, 2
          %s182 = smul.addr %s181, 4
          %s183 = scalar_lea.vmem %s0, %s182
          %s184 = smul.u32 8, %s25
        $region16: #{forward.4} parent=11 // pred_fallthru
          _
      $region12: #{forward.4} parent=5 // pred_fallthru
        _
      %p185 = scmp.lt.s32.totalorder %s16, 7
      // Predicated region
      $region17: #{forward.4} parent=5 // pred_check
        %p186 = pneg %p185
      $region18: #{forward.4} parent=5 // pred_check_branch
        %188 = sbr.rel (%p186) target = $region20
      $region19: #{forward.4} parent=5 // pred_region
        // Predicated region
        $region21: #{forward.4} parent=19 // pred_check
          %p189 = pneg %p74
        $region22: #{forward.4} parent=19 // pred_check_branch
          %191 = sbr.rel (%p189) target = $region24
        $region23: #{forward.4} parent=19 // pred_region
          %s192 = sand.u32 %s64, 1
          %s193 = scalar_lea.sflag [#allocation3], %s192
          %s194 = sand.u32 %s64, 1
          %s195 = smul.addr %s194, 512
          %s196 = scalar_lea.vmem [#allocation2], %s195
          %s197 = smul.u32 4, %s24
          %199 = vsyncadd %s193, 0
          %s200 = smul.addr %s197, 4
          %s201 = scalar_lea.hbm %s1, %s200
          %s202 = sshll.u32 %s201, 4
          %s203 = int_to_ptr.hbm [resolvable:$true] %s202
          %s204 = sshll.u32 %s196, 4
          %s205 = int_to_ptr.vmem [resolvable:$true] %s204
          %210 = dma.hbm_to_vmem [thread:$0]  %s203, 8192, %s205, %s193, 1792, 256, 16
        $region24: #{forward.4} parent=19 // pred_fallthru
          _
        // Predicated region
        $region25: #{forward.4} parent=19 // pred_check
          %p211 = pneg %p100
        $region26: #{forward.4} parent=19 // pred_check_branch
          %213 = sbr.rel (%p211) target = $region28
        $region27: #{forward.4} parent=19 // pred_region
          %s214 = sand.u32 %s16, 1
          %s215 = scalar_lea.sflag [#allocation5], %s214
          %s216 = sand.u32 %s90, 1
          %s217 = smul.addr %s216, 4
          %s218 = scalar_lea.vmem [#allocation4], %s217
          %s219 = smul.u32 4, %s24
          %221 = vsyncadd %s215, 0
          %s222 = scalar_lea.hbm %s2, %s219
          %s224 = sshll.u32 %s222, 4
          %s225 = int_to_ptr.hbm [resolvable:$true] %s224
          %s226 = sshll.u32 %s218, 4
          %s227 = int_to_ptr.vmem [resolvable:$true] %s226
          %229 = dma.hbm_to_vmem [thread:$0]  %s225, 64, %s227, %s215
        $region28: #{forward.4} parent=19 // pred_fallthru
          _
        // Predicated region
        $region29: #{forward.4} parent=19 // pred_check
          %p230 = pneg %p126
        $region30: #{forward.4} parent=19 // pred_check_branch
          %232 = sbr.rel (%p230) target = $region32
        $region31: #{forward.4} parent=19 // pred_region
          %s233 = sand.u32 %s16, 1
          %s234 = scalar_lea.sflag [#allocation5], %s233
          %s235 = sand.u32 %s116, 1
          %s236 = smul.addr %s235, 4
          %s237 = scalar_lea.vmem [#allocation6], %s236
          %s238 = smul.u32 4, %s24
          %240 = vsyncadd %s234, 0
          %s241 = scalar_lea.hbm %s3, %s238
          %s243 = sshll.u32 %s241, 4
          %s244 = int_to_ptr.hbm [resolvable:$true] %s243
          %s245 = sshll.u32 %s237, 4
          %s246 = int_to_ptr.vmem [resolvable:$true] %s245
          %248 = dma.hbm_to_vmem [thread:$0]  %s244, 64, %s246, %s234
        $region32: #{forward.4} parent=19 // pred_fallthru
          _
      $region20: #{forward.4} parent=5 // pred_fallthru
        _
      %p249 = scmp.le.s32.totalorder 1, %s16
      %p250 = scmp.lt.s32.totalorder %s16, 8
      %p251 = pnand %p249, %p250
      %p252 = pneg %p251
      // Predicated region
      $region33: #{forward.4} parent=5 // pred_check
        _
      $region34: #{forward.4} parent=5 // pred_check_branch
        %254 = sbr.rel (%p251) target = $region36
      $region35: #{forward.4} parent=5 // pred_region
        %s255 = ssub.s32 %s16, 1
        %s256 = sand.u32 %s67, 1
        %s257 = scalar_lea.sflag [#allocation3], %s256
        %s258 = sand.u32 %s67, 1
        %s259 = smul.addr %s258, 512
        %s260 = scalar_lea.vmem [#allocation2], %s259
        // Predicated region
        $region37: #{forward.4} parent=35 // pred_check
          %p261 = pneg %p80
        $region38: #{forward.4} parent=35 // pred_check_branch
          %263 = sbr.rel (%p261) target = $region40
        $region39: #{forward.4} parent=35 // pred_region
          %265 = dma.done %s257, 8192
        $region40: #{forward.4} parent=35 // pred_fallthru
          _
        %s266 = sand.u32 %s21, 1
        %s267 = scalar_lea.sflag [#allocation5], %s266
        %s268 = sand.u32 %s93, 1
        %s269 = smul.addr %s268, 4
        %s270 = scalar_lea.vmem [#allocation4], %s269
        // Predicated region
        $region41: #{forward.4} parent=35 // pred_check
          %p271 = pneg %p106
        $region42: #{forward.4} parent=35 // pred_check_branch
          %273 = sbr.rel (%p271) target = $region44
        $region43: #{forward.4} parent=35 // pred_region
          %275 = dma.done %s267, 64
        $region44: #{forward.4} parent=35 // pred_fallthru
          _
        %s276 = sand.u32 %s21, 1
        %s277 = scalar_lea.sflag [#allocation5], %s276
        %s278 = sand.u32 %s119, 1
        %s279 = smul.addr %s278, 4
        %s280 = scalar_lea.vmem [#allocation6], %s279
        // Predicated region
        $region45: #{forward.4} parent=35 // pred_check
          %p281 = pneg %p132
        $region46: #{forward.4} parent=35 // pred_check_branch
          %283 = sbr.rel (%p281) target = $region48
        $region47: #{forward.4} parent=35 // pred_region
          %285 = dma.done %s277, 64
        $region48: #{forward.4} parent=35 // pred_fallthru
          _
        %s286 = smul.u32 8, %s25
        %p287 = scmp.lt.s32.totalorder %s286, 7
        %s288 = scalar_select %p287, %s286, 7
        %s289 = smul.addr %s288, 2
        %s290 = smul.addr %s289, 4
        %s291 = scalar_lea.vmem %s0, %s290
        %p292 = pneg %p54
        %p293 = pneg %p51
        %s294 = sand.u32 %s67, 1
        %s295 = scalar_lea.sflag [#allocation3], %s294
        %s296 = sand.u32 %s67, 1
        %s297 = smul.addr %s296, 512
        %s298 = scalar_lea.vmem [#allocation2], %s297
        %p299 = pneg %p80
        %p300 = pneg %p77
        %s301 = sand.u32 %s21, 1
        %s302 = scalar_lea.sflag [#allocation5], %s301
        %s303 = sand.u32 %s93, 1
        %s304 = smul.addr %s303, 4
        %s305 = scalar_lea.vmem [#allocation4], %s304
        %p306 = pneg %p106
        %p307 = pneg %p103
        %s308 = sand.u32 %s21, 1
        %s309 = scalar_lea.sflag [#allocation5], %s308
        %s310 = sand.u32 %s119, 1
        %s311 = smul.addr %s310, 4
        %s312 = scalar_lea.vmem [#allocation6], %s311
        %p313 = pneg %p132
        %p314 = pneg %p129
        %p315 = pneg %p160
        %p316 = pneg %p157
        %s317 = sand.u32 %s147, 1
        %s318 = sand.u32 %s147, 1
        %s319 = smul.addr %s318, 128
        %s320 = scalar_lea.vmem [#allocation7], %s319
        %s321 = smul.u32 8, %s25
        %p322 = scmp.lt.s32.totalorder %s321, 7
        %s323 = scalar_select %p322, %s321, 7
        %s324 = smul.addr %s323, 2
        %s325 = smul.addr %s324, 4
        %s326 = scalar_lea.vmem %s0, %s325
        %s327 = smul.u32 8, %s25
        %s328 = smul.u32 4, %s26
        %s329 = smul.u32 4, %s26
        %s330 = smul.u32 4, %s26
        %s331 = smul.u32 8, %s25
        %s332 = smul.u32 4, %s26
        %v333 = vld [vmem:[%s326] sm:$0xff]
        %v334 = vld [vmem:[%s326 + $0x8] sm:$0xff]
        %v335 = vld [vmem:[%s326 + $0x10] sm:$0xff]
        %v336 = vld [vmem:[%s326 + $0x18] sm:$0xff]
        %v337 = vld [vmem:[%s326 + $0x20] sm:$0xff]
        %v338 = vld [vmem:[%s326 + $0x28] sm:$0xff]
        %v339 = vld [vmem:[%s326 + $0x30] sm:$0xff]
        %v340 = vld [vmem:[%s326 + $0x38] sm:$0xff]
        %v341 = vld [vmem:[%s260] sm:$0xff]
        %v342 = vld [vmem:[%s260 + $0x8] sm:$0xff]
        %v343 = vld [vmem:[%s260 + $0x10] sm:$0xff]
        %v344 = vld [vmem:[%s260 + $0x18] sm:$0xff]
        %v345 = vld [vmem:[%s260 + $0x20] sm:$0xff]
        %v346 = vld [vmem:[%s260 + $0x28] sm:$0xff]
        %v347 = vld [vmem:[%s260 + $0x30] sm:$0xff]
        %v348 = vld [vmem:[%s260 + $0x38] sm:$0xff]
        %v349 = vld [vmem:[%s260 + $0x40] sm:$0xff]
        %v350 = vld [vmem:[%s260 + $0x48] sm:$0xff]
        %v351 = vld [vmem:[%s260 + $0x50] sm:$0xff]
        %v352 = vld [vmem:[%s260 + $0x58] sm:$0xff]
        %v353 = vld [vmem:[%s260 + $0x60] sm:$0xff]
        %v354 = vld [vmem:[%s260 + $0x68] sm:$0xff]
        %v355 = vld [vmem:[%s260 + $0x70] sm:$0xff]
        %v356 = vld [vmem:[%s260 + $0x78] sm:$0xff]
        %v357 = vld [vmem:[%s260 + $0x80] sm:$0xff]
        %v358 = vld [vmem:[%s260 + $0x88] sm:$0xff]
        %v359 = vld [vmem:[%s260 + $0x90] sm:$0xff]
        %v360 = vld [vmem:[%s260 + $0x98] sm:$0xff]
        %v361 = vld [vmem:[%s260 + $0xa0] sm:$0xff]
        %v362 = vld [vmem:[%s260 + $0xa8] sm:$0xff]
        %v363 = vld [vmem:[%s260 + $0xb0] sm:$0xff]
        %v364 = vld [vmem:[%s260 + $0xb8] sm:$0xff]
        %v365 = vld [vmem:[%s260 + $0xc0] sm:$0xff]
        %v366 = vld [vmem:[%s260 + $0xc8] sm:$0xff]
        %v367 = vld [vmem:[%s260 + $0xd0] sm:$0xff]
        %v368 = vld [vmem:[%s260 + $0xd8] sm:$0xff]
        %v369 = vld [vmem:[%s260 + $0xe0] sm:$0xff]
        %v370 = vld [vmem:[%s260 + $0xe8] sm:$0xff]
        %v371 = vld [vmem:[%s260 + $0xf0] sm:$0xff]
        %v372 = vld [vmem:[%s260 + $0xf8] sm:$0xff]
        %v373 = vld [vmem:[%s260 + $0x100] sm:$0xff]
        %v374 = vld [vmem:[%s260 + $0x108] sm:$0xff]
        %v375 = vld [vmem:[%s260 + $0x110] sm:$0xff]
        %v376 = vld [vmem:[%s260 + $0x118] sm:$0xff]
        %v377 = vld [vmem:[%s260 + $0x120] sm:$0xff]
        %v378 = vld [vmem:[%s260 + $0x128] sm:$0xff]
        %v379 = vld [vmem:[%s260 + $0x130] sm:$0xff]
        %v380 = vld [vmem:[%s260 + $0x138] sm:$0xff]
        %v381 = vld [vmem:[%s260 + $0x140] sm:$0xff]
        %v382 = vld [vmem:[%s260 + $0x148] sm:$0xff]
        %v383 = vld [vmem:[%s260 + $0x150] sm:$0xff]
        %v384 = vld [vmem:[%s260 + $0x158] sm:$0xff]
        %v385 = vld [vmem:[%s260 + $0x160] sm:$0xff]
        %v386 = vld [vmem:[%s260 + $0x168] sm:$0xff]
        %v387 = vld [vmem:[%s260 + $0x170] sm:$0xff]
        %v388 = vld [vmem:[%s260 + $0x178] sm:$0xff]
        %v389 = vld [vmem:[%s260 + $0x180] sm:$0xff]
        %v390 = vld [vmem:[%s260 + $0x188] sm:$0xff]
        %v391 = vld [vmem:[%s260 + $0x190] sm:$0xff]
        %v392 = vld [vmem:[%s260 + $0x198] sm:$0xff]
        %v393 = vld [vmem:[%s260 + $0x1a0] sm:$0xff]
        %v394 = vld [vmem:[%s260 + $0x1a8] sm:$0xff]
        %v395 = vld [vmem:[%s260 + $0x1b0] sm:$0xff]
        %v396 = vld [vmem:[%s260 + $0x1b8] sm:$0xff]
        %v397 = vld [vmem:[%s260 + $0x1c0] sm:$0xff]
        %v398 = vld [vmem:[%s260 + $0x1c8] sm:$0xff]
        %v399 = vld [vmem:[%s260 + $0x1d0] sm:$0xff]
        %v400 = vld [vmem:[%s260 + $0x1d8] sm:$0xff]
        %v401 = vld [vmem:[%s260 + $0x1e0] sm:$0xff]
        %v402 = vld [vmem:[%s260 + $0x1e8] sm:$0xff]
        %v403 = vld [vmem:[%s260 + $0x1f0] sm:$0xff]
        %v404 = vld [vmem:[%s260 + $0x1f8] sm:$0xff]
        %v413 = vunpack.c.l.b16 %v333
        %v414 = vunpack.c.h.b16 %v333
        %v415 = vunpack.c.l.b16 %v334
        %v416 = vunpack.c.h.b16 %v334
        %v417 = vunpack.c.l.b16 %v335
        %v418 = vunpack.c.h.b16 %v335
        %v419 = vunpack.c.l.b16 %v336
        %v420 = vunpack.c.h.b16 %v336
        %v421 = vunpack.c.l.b16 %v337
        %v422 = vunpack.c.h.b16 %v337
        %v423 = vunpack.c.l.b16 %v338
        %v424 = vunpack.c.h.b16 %v338
        %v425 = vunpack.c.l.b16 %v339
        %v426 = vunpack.c.h.b16 %v339
        %v427 = vunpack.c.l.b16 %v340
        %v428 = vunpack.c.h.b16 %v340
        %v429 = vpack.c.b16 %v415, %v413
        %v430 = vpack.c.b16 %v416, %v414
        %v431 = vpack.c.b16 %v419, %v417
        %v432 = vpack.c.b16 %v420, %v418
        %v433 = vpack.c.b16 %v423, %v421
        %v434 = vpack.c.b16 %v424, %v422
        %v435 = vpack.c.b16 %v427, %v425
        %v436 = vpack.c.b16 %v428, %v426
        %v509 = vunpack.c.l.b16 %v341
        %v510 = vunpack.c.h.b16 %v341
        %v511 = vunpack.c.l.b16 %v342
        %v512 = vunpack.c.h.b16 %v342
        %v513 = vunpack.c.l.b16 %v343
        %v514 = vunpack.c.h.b16 %v343
        %v515 = vunpack.c.l.b16 %v344
        %v516 = vunpack.c.h.b16 %v344
        %v517 = vunpack.c.l.b16 %v345
        %v518 = vunpack.c.h.b16 %v345
        %v519 = vunpack.c.l.b16 %v346
        %v520 = vunpack.c.h.b16 %v346
        %v521 = vunpack.c.l.b16 %v347
        %v522 = vunpack.c.h.b16 %v347
        %v523 = vunpack.c.l.b16 %v348
        %v524 = vunpack.c.h.b16 %v348
        %v525 = vunpack.c.l.b16 %v349
        %v526 = vunpack.c.h.b16 %v349
        %v527 = vunpack.c.l.b16 %v350
        %v528 = vunpack.c.h.b16 %v350
        %v529 = vunpack.c.l.b16 %v351
        %v530 = vunpack.c.h.b16 %v351
        %v531 = vunpack.c.l.b16 %v352
        %v532 = vunpack.c.h.b16 %v352
        %v533 = vunpack.c.l.b16 %v353
        %v534 = vunpack.c.h.b16 %v353
        %v535 = vunpack.c.l.b16 %v354
        %v536 = vunpack.c.h.b16 %v354
        %v537 = vunpack.c.l.b16 %v355
        %v538 = vunpack.c.h.b16 %v355
        %v539 = vunpack.c.l.b16 %v356
        %v540 = vunpack.c.h.b16 %v356
        %v541 = vunpack.c.l.b16 %v357
        %v542 = vunpack.c.h.b16 %v357
        %v543 = vunpack.c.l.b16 %v358
        %v544 = vunpack.c.h.b16 %v358
        %v545 = vunpack.c.l.b16 %v359
        %v546 = vunpack.c.h.b16 %v359
        %v547 = vunpack.c.l.b16 %v360
        %v548 = vunpack.c.h.b16 %v360
        %v549 = vunpack.c.l.b16 %v361
        %v550 = vunpack.c.h.b16 %v361
        %v551 = vunpack.c.l.b16 %v362
        %v552 = vunpack.c.h.b16 %v362
        %v553 = vunpack.c.l.b16 %v363
        %v554 = vunpack.c.h.b16 %v363
        %v555 = vunpack.c.l.b16 %v364
        %v556 = vunpack.c.h.b16 %v364
        %v557 = vunpack.c.l.b16 %v365
        %v558 = vunpack.c.h.b16 %v365
        %v559 = vunpack.c.l.b16 %v366
        %v560 = vunpack.c.h.b16 %v366
        %v561 = vunpack.c.l.b16 %v367
        %v562 = vunpack.c.h.b16 %v367
        %v563 = vunpack.c.l.b16 %v368
        %v564 = vunpack.c.h.b16 %v368
        %v565 = vunpack.c.l.b16 %v369
        %v566 = vunpack.c.h.b16 %v369
        %v567 = vunpack.c.l.b16 %v370
        %v568 = vunpack.c.h.b16 %v370
        %v569 = vunpack.c.l.b16 %v371
        %v570 = vunpack.c.h.b16 %v371
        %v571 = vunpack.c.l.b16 %v372
        %v572 = vunpack.c.h.b16 %v372
        %v573 = vunpack.c.l.b16 %v373
        %v574 = vunpack.c.h.b16 %v373
        %v575 = vunpack.c.l.b16 %v374
        %v576 = vunpack.c.h.b16 %v374
        %v577 = vunpack.c.l.b16 %v375
        %v578 = vunpack.c.h.b16 %v375
        %v579 = vunpack.c.l.b16 %v376
        %v580 = vunpack.c.h.b16 %v376
        %v581 = vunpack.c.l.b16 %v377
        %v582 = vunpack.c.h.b16 %v377
        %v583 = vunpack.c.l.b16 %v378
        %v584 = vunpack.c.h.b16 %v378
        %v585 = vunpack.c.l.b16 %v379
        %v586 = vunpack.c.h.b16 %v379
        %v587 = vunpack.c.l.b16 %v380
        %v588 = vunpack.c.h.b16 %v380
        %v589 = vunpack.c.l.b16 %v381
        %v590 = vunpack.c.h.b16 %v381
        %v591 = vunpack.c.l.b16 %v382
        %v592 = vunpack.c.h.b16 %v382
        %v593 = vunpack.c.l.b16 %v383
        %v594 = vunpack.c.h.b16 %v383
        %v595 = vunpack.c.l.b16 %v384
        %v596 = vunpack.c.h.b16 %v384
        %v597 = vunpack.c.l.b16 %v385
        %v598 = vunpack.c.h.b16 %v385
        %v599 = vunpack.c.l.b16 %v386
        %v600 = vunpack.c.h.b16 %v386
        %v601 = vunpack.c.l.b16 %v387
        %v602 = vunpack.c.h.b16 %v387
        %v603 = vunpack.c.l.b16 %v388
        %v604 = vunpack.c.h.b16 %v388
        %v605 = vunpack.c.l.b16 %v389
        %v606 = vunpack.c.h.b16 %v389
        %v607 = vunpack.c.l.b16 %v390
        %v608 = vunpack.c.h.b16 %v390
        %v609 = vunpack.c.l.b16 %v391
        %v610 = vunpack.c.h.b16 %v391
        %v611 = vunpack.c.l.b16 %v392
        %v612 = vunpack.c.h.b16 %v392
        %v613 = vunpack.c.l.b16 %v393
        %v614 = vunpack.c.h.b16 %v393
        %v615 = vunpack.c.l.b16 %v394
        %v616 = vunpack.c.h.b16 %v394
        %v617 = vunpack.c.l.b16 %v395
        %v618 = vunpack.c.h.b16 %v395
        %v619 = vunpack.c.l.b16 %v396
        %v620 = vunpack.c.h.b16 %v396
        %v621 = vunpack.c.l.b16 %v397
        %v622 = vunpack.c.h.b16 %v397
        %v623 = vunpack.c.l.b16 %v398
        %v624 = vunpack.c.h.b16 %v398
        %v625 = vunpack.c.l.b16 %v399
        %v626 = vunpack.c.h.b16 %v399
        %v627 = vunpack.c.l.b16 %v400
        %v628 = vunpack.c.h.b16 %v400
        %v629 = vunpack.c.l.b16 %v401
        %v630 = vunpack.c.h.b16 %v401
        %v631 = vunpack.c.l.b16 %v402
        %v632 = vunpack.c.h.b16 %v402
        %v633 = vunpack.c.l.b16 %v403
        %v634 = vunpack.c.h.b16 %v403
        %v635 = vunpack.c.l.b16 %v404
        %v636 = vunpack.c.h.b16 %v404
        %v637 = vpack.c.b16 %v513, %v509
        %v638 = vpack.c.b16 %v514, %v510
        %v639 = vpack.c.b16 %v515, %v511
        %v640 = vpack.c.b16 %v516, %v512
        %v641 = vpack.c.b16 %v521, %v517
        %v642 = vpack.c.b16 %v522, %v518
        %v643 = vpack.c.b16 %v523, %v519
        %v644 = vpack.c.b16 %v524, %v520
        %v645 = vpack.c.b16 %v529, %v525
        %v646 = vpack.c.b16 %v530, %v526
        %v647 = vpack.c.b16 %v531, %v527
        %v648 = vpack.c.b16 %v532, %v528
        %v649 = vpack.c.b16 %v537, %v533
        %v650 = vpack.c.b16 %v538, %v534
        %v651 = vpack.c.b16 %v539, %v535
        %v652 = vpack.c.b16 %v540, %v536
        %v653 = vpack.c.b16 %v545, %v541
        %v654 = vpack.c.b16 %v546, %v542
        %v655 = vpack.c.b16 %v547, %v543
        %v656 = vpack.c.b16 %v548, %v544
        %v657 = vpack.c.b16 %v553, %v549
        %v658 = vpack.c.b16 %v554, %v550
        %v659 = vpack.c.b16 %v555, %v551
        %v660 = vpack.c.b16 %v556, %v552
        %v661 = vpack.c.b16 %v561, %v557
        %v662 = vpack.c.b16 %v562, %v558
        %v663 = vpack.c.b16 %v563, %v559
        %v664 = vpack.c.b16 %v564, %v560
        %v665 = vpack.c.b16 %v569, %v565
        %v666 = vpack.c.b16 %v570, %v566
        %v667 = vpack.c.b16 %v571, %v567
        %v668 = vpack.c.b16 %v572, %v568
        %v669 = vpack.c.b16 %v577, %v573
        %v670 = vpack.c.b16 %v578, %v574
        %v671 = vpack.c.b16 %v579, %v575
        %v672 = vpack.c.b16 %v580, %v576
        %v673 = vpack.c.b16 %v585, %v581
        %v674 = vpack.c.b16 %v586, %v582
        %v675 = vpack.c.b16 %v587, %v583
        %v676 = vpack.c.b16 %v588, %v584
        %v677 = vpack.c.b16 %v593, %v589
        %v678 = vpack.c.b16 %v594, %v590
        %v679 = vpack.c.b16 %v595, %v591
        %v680 = vpack.c.b16 %v596, %v592
        %v681 = vpack.c.b16 %v601, %v597
        %v682 = vpack.c.b16 %v602, %v598
        %v683 = vpack.c.b16 %v603, %v599
        %v684 = vpack.c.b16 %v604, %v600
        %v685 = vpack.c.b16 %v609, %v605
        %v686 = vpack.c.b16 %v610, %v606
        %v687 = vpack.c.b16 %v611, %v607
        %v688 = vpack.c.b16 %v612, %v608
        %v689 = vpack.c.b16 %v617, %v613
        %v690 = vpack.c.b16 %v618, %v614
        %v691 = vpack.c.b16 %v619, %v615
        %v692 = vpack.c.b16 %v620, %v616
        %v693 = vpack.c.b16 %v625, %v621
        %v694 = vpack.c.b16 %v626, %v622
        %v695 = vpack.c.b16 %v627, %v623
        %v696 = vpack.c.b16 %v628, %v624
        %v697 = vpack.c.b16 %v633, %v629
        %v698 = vpack.c.b16 %v634, %v630
        %v699 = vpack.c.b16 %v635, %v631
        %v700 = vpack.c.b16 %v636, %v632
        %765 = vmatpush.bf16.msra.mxu0 %v665
        %766 = vmatpush.bf16.msra.mxu0 %v661
        %767 = vmatpush.bf16.msra.mxu0 %v657
        %768 = vmatpush.bf16.msra.mxu0 %v653
        %769 = vmatpush.bf16.msra.mxu0 %v649
        %770 = vmatpush.bf16.msra.mxu0 %v645
        %771 = vmatpush.bf16.msra.mxu0 %v641
        %772 = vmatpush.bf16.msra.mxu0 %v637
        %773 = vmatmul.bf16.gmra.mxu0 %v429
        %v774 = vpop.f32.mrf.mxu0
        %v775 = vadd.f32 0.0, %v774
        %v776 = vpop.f32.mrf.mxu0
        %v777 = vadd.f32 0.0, %v776
        %778 = vmatmul.bf16.gmra.mxu0 %v431
        %v779 = vpop.f32.mrf.mxu0
        %v780 = vadd.f32 0.0, %v779
        %v781 = vpop.f32.mrf.mxu0
        %v782 = vadd.f32 0.0, %v781
        %783 = vmatmul.bf16.gmra.mxu0 %v433
        %v784 = vpop.f32.mrf.mxu0
        %v785 = vadd.f32 0.0, %v784
        %v786 = vpop.f32.mrf.mxu0
        %v787 = vadd.f32 0.0, %v786
        %788 = vmatmul.bf16.gmra.mxu0 %v435
        %v789 = vpop.f32.mrf.mxu0
        %v790 = vadd.f32 0.0, %v789
        %v791 = vpop.f32.mrf.mxu0
        %v792 = vadd.f32 0.0, %v791
        %793 = vdwg.mxu0
        %794 = vmatpush.bf16.msra.mxu0 %v697
        %795 = vmatpush.bf16.msra.mxu0 %v693
        %796 = vmatpush.bf16.msra.mxu0 %v689
        %797 = vmatpush.bf16.msra.mxu0 %v685
        %798 = vmatpush.bf16.msra.mxu0 %v681
        %799 = vmatpush.bf16.msra.mxu0 %v677
        %800 = vmatpush.bf16.msra.mxu0 %v673
        %801 = vmatpush.bf16.msra.mxu0 %v669
        %802 = vmatmul.bf16.gmra.mxu0 %v430
        %v803 = vpop.f32.mrf.mxu0
        %v804 = vadd.f32 %v775, %v803
        %v805 = vpop.f32.mrf.mxu0
        %v806 = vadd.f32 %v777, %v805
        %807 = vmatmul.bf16.gmra.mxu0 %v432
        %v808 = vpop.f32.mrf.mxu0
        %v809 = vadd.f32 %v780, %v808
        %v810 = vpop.f32.mrf.mxu0
        %v811 = vadd.f32 %v782, %v810
        %812 = vmatmul.bf16.gmra.mxu0 %v434
        %v813 = vpop.f32.mrf.mxu0
        %v814 = vadd.f32 %v785, %v813
        %v815 = vpop.f32.mrf.mxu0
        %v816 = vadd.f32 %v787, %v815
        %817 = vmatmul.bf16.gmra.mxu0 %v436
        %v818 = vpop.f32.mrf.mxu0
        %v819 = vadd.f32 %v790, %v818
        %v820 = vpop.f32.mrf.mxu0
        %v821 = vadd.f32 %v792, %v820
        %822 = vdwg.mxu0
        %823 = vmatpush.bf16.msra.mxu0 %v666
        %824 = vmatpush.bf16.msra.mxu0 %v662
        %825 = vmatpush.bf16.msra.mxu0 %v658
        %826 = vmatpush.bf16.msra.mxu0 %v654
        %827 = vmatpush.bf16.msra.mxu0 %v650
        %828 = vmatpush.bf16.msra.mxu0 %v646
        %829 = vmatpush.bf16.msra.mxu0 %v642
        %830 = vmatpush.bf16.msra.mxu0 %v638
        %831 = vmatmul.bf16.gmra.mxu0 %v429
        %v832 = vpop.f32.mrf.mxu0
        %v833 = vadd.f32 0.0, %v832
        %v834 = vpop.f32.mrf.mxu0
        %v835 = vadd.f32 0.0, %v834
        %836 = vmatmul.bf16.gmra.mxu0 %v431
        %v837 = vpop.f32.mrf.mxu0
        %v838 = vadd.f32 0.0, %v837
        %v839 = vpop.f32.mrf.mxu0
        %v840 = vadd.f32 0.0, %v839
        %841 = vmatmul.bf16.gmra.mxu0 %v433
        %v842 = vpop.f32.mrf.mxu0
        %v843 = vadd.f32 0.0, %v842
        %v844 = vpop.f32.mrf.mxu0
        %v845 = vadd.f32 0.0, %v844
        %846 = vmatmul.bf16.gmra.mxu0 %v435
        %v847 = vpop.f32.mrf.mxu0
        %v848 = vadd.f32 0.0, %v847
        %v849 = vpop.f32.mrf.mxu0
        %v850 = vadd.f32 0.0, %v849
        %851 = vdwg.mxu0
        %852 = vmatpush.bf16.msra.mxu0 %v698
        %853 = vmatpush.bf16.msra.mxu0 %v694
        %854 = vmatpush.bf16.msra.mxu0 %v690
        %855 = vmatpush.bf16.msra.mxu0 %v686
        %856 = vmatpush.bf16.msra.mxu0 %v682
        %857 = vmatpush.bf16.msra.mxu0 %v678
        %858 = vmatpush.bf16.msra.mxu0 %v674
        %859 = vmatpush.bf16.msra.mxu0 %v670
        %860 = vmatmul.bf16.gmra.mxu0 %v430
        %v861 = vpop.f32.mrf.mxu0
        %v862 = vadd.f32 %v833, %v861
        %v863 = vpop.f32.mrf.mxu0
        %v864 = vadd.f32 %v835, %v863
        %865 = vmatmul.bf16.gmra.mxu0 %v432
        %v866 = vpop.f32.mrf.mxu0
        %v867 = vadd.f32 %v838, %v866
        %v868 = vpop.f32.mrf.mxu0
        %v869 = vadd.f32 %v840, %v868
        %870 = vmatmul.bf16.gmra.mxu0 %v434
        %v871 = vpop.f32.mrf.mxu0
        %v872 = vadd.f32 %v843, %v871
        %v873 = vpop.f32.mrf.mxu0
        %v874 = vadd.f32 %v845, %v873
        %875 = vmatmul.bf16.gmra.mxu0 %v436
        %v876 = vpop.f32.mrf.mxu0
        %v877 = vadd.f32 %v848, %v876
        %v878 = vpop.f32.mrf.mxu0
        %v879 = vadd.f32 %v850, %v878
        %880 = vdwg.mxu0
        %881 = vmatpush.bf16.msra.mxu0 %v667
        %882 = vmatpush.bf16.msra.mxu0 %v663
        %883 = vmatpush.bf16.msra.mxu0 %v659
        %884 = vmatpush.bf16.msra.mxu0 %v655
        %885 = vmatpush.bf16.msra.mxu0 %v651
        %886 = vmatpush.bf16.msra.mxu0 %v647
        %887 = vmatpush.bf16.msra.mxu0 %v643
        %888 = vmatpush.bf16.msra.mxu0 %v639
        %889 = vmatmul.bf16.gmra.mxu0 %v429
        %v890 = vpop.f32.mrf.mxu0
        %v891 = vadd.f32 0.0, %v890
        %v892 = vpop.f32.mrf.mxu0
        %v893 = vadd.f32 0.0, %v892
        %894 = vmatmul.bf16.gmra.mxu0 %v431
        %v895 = vpop.f32.mrf.mxu0
        %v896 = vadd.f32 0.0, %v895
        %v897 = vpop.f32.mrf.mxu0
        %v898 = vadd.f32 0.0, %v897
        %899 = vmatmul.bf16.gmra.mxu0 %v433
        %v900 = vpop.f32.mrf.mxu0
        %v901 = vadd.f32 0.0, %v900
        %v902 = vpop.f32.mrf.mxu0
        %v903 = vadd.f32 0.0, %v902
        %904 = vmatmul.bf16.gmra.mxu0 %v435
        %v905 = vpop.f32.mrf.mxu0
        %v906 = vadd.f32 0.0, %v905
        %v907 = vpop.f32.mrf.mxu0
        %v908 = vadd.f32 0.0, %v907
        %909 = vdwg.mxu0
        %910 = vmatpush.bf16.msra.mxu0 %v699
        %911 = vmatpush.bf16.msra.mxu0 %v695
        %912 = vmatpush.bf16.msra.mxu0 %v691
        %913 = vmatpush.bf16.msra.mxu0 %v687
        %914 = vmatpush.bf16.msra.mxu0 %v683
        %915 = vmatpush.bf16.msra.mxu0 %v679
        %916 = vmatpush.bf16.msra.mxu0 %v675
        %917 = vmatpush.bf16.msra.mxu0 %v671
        %918 = vmatmul.bf16.gmra.mxu0 %v430
        %v919 = vpop.f32.mrf.mxu0
        %v920 = vadd.f32 %v891, %v919
        %v921 = vpop.f32.mrf.mxu0
        %v922 = vadd.f32 %v893, %v921
        %923 = vmatmul.bf16.gmra.mxu0 %v432
        %v924 = vpop.f32.mrf.mxu0
        %v925 = vadd.f32 %v896, %v924
        %v926 = vpop.f32.mrf.mxu0
        %v927 = vadd.f32 %v898, %v926
        %928 = vmatmul.bf16.gmra.mxu0 %v434
        %v929 = vpop.f32.mrf.mxu0
        %v930 = vadd.f32 %v901, %v929
        %v931 = vpop.f32.mrf.mxu0
        %v932 = vadd.f32 %v903, %v931
        %933 = vmatmul.bf16.gmra.mxu0 %v436
        %v934 = vpop.f32.mrf.mxu0
        %v935 = vadd.f32 %v906, %v934
        %v936 = vpop.f32.mrf.mxu0
        %v937 = vadd.f32 %v908, %v936
        %938 = vdwg.mxu0
        %939 = vmatpush.bf16.msra.mxu0 %v668
        %940 = vmatpush.bf16.msra.mxu0 %v664
        %941 = vmatpush.bf16.msra.mxu0 %v660
        %942 = vmatpush.bf16.msra.mxu0 %v656
        %943 = vmatpush.bf16.msra.mxu0 %v652
        %944 = vmatpush.bf16.msra.mxu0 %v648
        %945 = vmatpush.bf16.msra.mxu0 %v644
        %946 = vmatpush.bf16.msra.mxu0 %v640
        %947 = vmatmul.bf16.gmra.mxu0 %v429
        %v948 = vpop.f32.mrf.mxu0
        %v949 = vadd.f32 0.0, %v948
        %v950 = vpop.f32.mrf.mxu0
        %v951 = vadd.f32 0.0, %v950
        %952 = vmatmul.bf16.gmra.mxu0 %v431
        %v953 = vpop.f32.mrf.mxu0
        %v954 = vadd.f32 0.0, %v953
        %v955 = vpop.f32.mrf.mxu0
        %v956 = vadd.f32 0.0, %v955
        %957 = vmatmul.bf16.gmra.mxu0 %v433
        %v958 = vpop.f32.mrf.mxu0
        %v959 = vadd.f32 0.0, %v958
        %v960 = vpop.f32.mrf.mxu0
        %v961 = vadd.f32 0.0, %v960
        %962 = vmatmul.bf16.gmra.mxu0 %v435
        %v963 = vpop.f32.mrf.mxu0
        %v964 = vadd.f32 0.0, %v963
        %v965 = vpop.f32.mrf.mxu0
        %v966 = vadd.f32 0.0, %v965
        %967 = vdwg.mxu0
        %968 = vmatpush.bf16.msra.mxu0 %v700
        %969 = vmatpush.bf16.msra.mxu0 %v696
        %970 = vmatpush.bf16.msra.mxu0 %v692
        %971 = vmatpush.bf16.msra.mxu0 %v688
        %972 = vmatpush.bf16.msra.mxu0 %v684
        %973 = vmatpush.bf16.msra.mxu0 %v680
        %974 = vmatpush.bf16.msra.mxu0 %v676
        %975 = vmatpush.bf16.msra.mxu0 %v672
        %976 = vmatmul.bf16.gmra.mxu0 %v430
        %v977 = vpop.f32.mrf.mxu0
        %v978 = vadd.f32 %v949, %v977
        %v979 = vpop.f32.mrf.mxu0
        %v980 = vadd.f32 %v951, %v979
        %981 = vmatmul.bf16.gmra.mxu0 %v432
        %v982 = vpop.f32.mrf.mxu0
        %v983 = vadd.f32 %v954, %v982
        %v984 = vpop.f32.mrf.mxu0
        %v985 = vadd.f32 %v956, %v984
        %986 = vmatmul.bf16.gmra.mxu0 %v434
        %v987 = vpop.f32.mrf.mxu0
        %v988 = vadd.f32 %v959, %v987
        %v989 = vpop.f32.mrf.mxu0
        %v990 = vadd.f32 %v961, %v989
        %991 = vmatmul.bf16.gmra.mxu0 %v436
        %v992 = vpop.f32.mrf.mxu0
        %v993 = vadd.f32 %v964, %v992
        %v994 = vpop.f32.mrf.mxu0
        %v995 = vadd.f32 %v966, %v994
        %996 = vdwg.mxu0
        %v997 = vld [vmem:[%s270] sm:$0xf]
        %v999 = vperm.slane %v997, 0
        %v1000 = vperm.slane %v997, 1
        %v1001 = vperm.slane %v997, 2
        %v1002 = vperm.slane %v997, 3
        %v1007 = vmul.f32 %v804, %v999
        %v1008 = vmul.f32 %v862, %v1000
        %v1009 = vmul.f32 %v920, %v1001
        %v1010 = vmul.f32 %v978, %v1002
        %v1011 = vmul.f32 %v806, %v999
        %v1012 = vmul.f32 %v864, %v1000
        %v1013 = vmul.f32 %v922, %v1001
        %v1014 = vmul.f32 %v980, %v1002
        %v1015 = vmul.f32 %v809, %v999
        %v1016 = vmul.f32 %v867, %v1000
        %v1017 = vmul.f32 %v925, %v1001
        %v1018 = vmul.f32 %v983, %v1002
        %v1019 = vmul.f32 %v811, %v999
        %v1020 = vmul.f32 %v869, %v1000
        %v1021 = vmul.f32 %v927, %v1001
        %v1022 = vmul.f32 %v985, %v1002
        %v1023 = vmul.f32 %v814, %v999
        %v1024 = vmul.f32 %v872, %v1000
        %v1025 = vmul.f32 %v930, %v1001
        %v1026 = vmul.f32 %v988, %v1002
        %v1027 = vmul.f32 %v816, %v999
        %v1028 = vmul.f32 %v874, %v1000
        %v1029 = vmul.f32 %v932, %v1001
        %v1030 = vmul.f32 %v990, %v1002
        %v1031 = vmul.f32 %v819, %v999
        %v1032 = vmul.f32 %v877, %v1000
        %v1033 = vmul.f32 %v935, %v1001
        %v1034 = vmul.f32 %v993, %v1002
        %v1035 = vmul.f32 %v821, %v999
        %v1036 = vmul.f32 %v879, %v1000
        %v1037 = vmul.f32 %v937, %v1001
        %v1038 = vmul.f32 %v995, %v1002
        %v1039 = vld [vmem:[%s280] sm:$0xf]
        %v1041 = vperm.slane %v1039, 0
        %v1042 = vperm.slane %v1039, 1
        %v1043 = vperm.slane %v1039, 2
        %v1044 = vperm.slane %v1039, 3
        %v1049 = vadd.f32 %v1007, %v1041
        %v1050 = vadd.f32 %v1008, %v1042
        %v1051 = vadd.f32 %v1009, %v1043
        %v1052 = vadd.f32 %v1010, %v1044
        %v1053 = vadd.f32 %v1011, %v1041
        %v1054 = vadd.f32 %v1012, %v1042
        %v1055 = vadd.f32 %v1013, %v1043
        %v1056 = vadd.f32 %v1014, %v1044
        %v1057 = vadd.f32 %v1015, %v1041
        %v1058 = vadd.f32 %v1016, %v1042
        %v1059 = vadd.f32 %v1017, %v1043
        %v1060 = vadd.f32 %v1018, %v1044
        %v1061 = vadd.f32 %v1019, %v1041
        %v1062 = vadd.f32 %v1020, %v1042
        %v1063 = vadd.f32 %v1021, %v1043
        %v1064 = vadd.f32 %v1022, %v1044
        %v1065 = vadd.f32 %v1023, %v1041
        %v1066 = vadd.f32 %v1024, %v1042
        %v1067 = vadd.f32 %v1025, %v1043
        %v1068 = vadd.f32 %v1026, %v1044
        %v1069 = vadd.f32 %v1027, %v1041
        %v1070 = vadd.f32 %v1028, %v1042
        %v1071 = vadd.f32 %v1029, %v1043
        %v1072 = vadd.f32 %v1030, %v1044
        %v1073 = vadd.f32 %v1031, %v1041
        %v1074 = vadd.f32 %v1032, %v1042
        %v1075 = vadd.f32 %v1033, %v1043
        %v1076 = vadd.f32 %v1034, %v1044
        %v1077 = vadd.f32 %v1035, %v1041
        %v1078 = vadd.f32 %v1036, %v1042
        %v1079 = vadd.f32 %v1037, %v1043
        %v1080 = vadd.f32 %v1038, %v1044
        %v1081 = vmul.f32 %v1049, 0.2
        %v1082 = vmul.f32 %v1050, 0.2
        %v1083 = vmul.f32 %v1051, 0.2
        %v1084 = vmul.f32 %v1052, 0.2
        %v1085 = vmul.f32 %v1053, 0.2
        %v1086 = vmul.f32 %v1054, 0.2
        %v1087 = vmul.f32 %v1055, 0.2
        %v1088 = vmul.f32 %v1056, 0.2
        %v1089 = vmul.f32 %v1057, 0.2
        %v1090 = vmul.f32 %v1058, 0.2
        %v1091 = vmul.f32 %v1059, 0.2
        %v1092 = vmul.f32 %v1060, 0.2
        %v1093 = vmul.f32 %v1061, 0.2
        %v1094 = vmul.f32 %v1062, 0.2
        %v1095 = vmul.f32 %v1063, 0.2
        %v1096 = vmul.f32 %v1064, 0.2
        %v1097 = vmul.f32 %v1065, 0.2
        %v1098 = vmul.f32 %v1066, 0.2
        %v1099 = vmul.f32 %v1067, 0.2
        %v1100 = vmul.f32 %v1068, 0.2
        %v1101 = vmul.f32 %v1069, 0.2
        %v1102 = vmul.f32 %v1070, 0.2
        %v1103 = vmul.f32 %v1071, 0.2
        %v1104 = vmul.f32 %v1072, 0.2
        %v1105 = vmul.f32 %v1073, 0.2
        %v1106 = vmul.f32 %v1074, 0.2
        %v1107 = vmul.f32 %v1075, 0.2
        %v1108 = vmul.f32 %v1076, 0.2
        %v1109 = vmul.f32 %v1077, 0.2
        %v1110 = vmul.f32 %v1078, 0.2
        %v1111 = vmul.f32 %v1079, 0.2
        %v1112 = vmul.f32 %v1080, 0.2
        %v1113 = vmax.f32 %v1049, %v1081
        %v1114 = vmax.f32 %v1050, %v1082
        %v1115 = vmax.f32 %v1051, %v1083
        %v1116 = vmax.f32 %v1052, %v1084
        %v1117 = vmax.f32 %v1053, %v1085
        %v1118 = vmax.f32 %v1054, %v1086
        %v1119 = vmax.f32 %v1055, %v1087
        %v1120 = vmax.f32 %v1056, %v1088
        %v1121 = vmax.f32 %v1057, %v1089
        %v1122 = vmax.f32 %v1058, %v1090
        %v1123 = vmax.f32 %v1059, %v1091
        %v1124 = vmax.f32 %v1060, %v1092
        %v1125 = vmax.f32 %v1061, %v1093
        %v1126 = vmax.f32 %v1062, %v1094
        %v1127 = vmax.f32 %v1063, %v1095
        %v1128 = vmax.f32 %v1064, %v1096
        %v1129 = vmax.f32 %v1065, %v1097
        %v1130 = vmax.f32 %v1066, %v1098
        %v1131 = vmax.f32 %v1067, %v1099
        %v1132 = vmax.f32 %v1068, %v1100
        %v1133 = vmax.f32 %v1069, %v1101
        %v1134 = vmax.f32 %v1070, %v1102
        %v1135 = vmax.f32 %v1071, %v1103
        %v1136 = vmax.f32 %v1072, %v1104
        %v1137 = vmax.f32 %v1073, %v1105
        %v1138 = vmax.f32 %v1074, %v1106
        %v1139 = vmax.f32 %v1075, %v1107
        %v1140 = vmax.f32 %v1076, %v1108
        %v1141 = vmax.f32 %v1077, %v1109
        %v1142 = vmax.f32 %v1078, %v1110
        %v1143 = vmax.f32 %v1079, %v1111
        %v1144 = vmax.f32 %v1080, %v1112
        %v1145 = vpack.c.bf16 %v1114, %v1113
        %v1146 = vpack.c.bf16 %v1116, %v1115
        %v1147 = vpack.c.bf16 %v1118, %v1117
        %v1148 = vpack.c.bf16 %v1120, %v1119
        %v1149 = vpack.c.bf16 %v1122, %v1121
        %v1150 = vpack.c.bf16 %v1124, %v1123
        %v1151 = vpack.c.bf16 %v1126, %v1125
        %v1152 = vpack.c.bf16 %v1128, %v1127
        %v1153 = vpack.c.bf16 %v1130, %v1129
        %v1154 = vpack.c.bf16 %v1132, %v1131
        %v1155 = vpack.c.bf16 %v1134, %v1133
        %v1156 = vpack.c.bf16 %v1136, %v1135
        %v1157 = vpack.c.bf16 %v1138, %v1137
        %v1158 = vpack.c.bf16 %v1140, %v1139
        %v1159 = vpack.c.bf16 %v1142, %v1141
        %v1160 = vpack.c.bf16 %v1144, %v1143
        %1161 = vst [vmem:[%s320] sm:$0xff] %v1145
        %1162 = vst [vmem:[%s320 + $0x8] sm:$0xff] %v1146
        %1163 = vst [vmem:[%s320 + $0x10] sm:$0xff] %v1147
        %1164 = vst [vmem:[%s320 + $0x18] sm:$0xff] %v1148
        %1165 = vst [vmem:[%s320 + $0x20] sm:$0xff] %v1149
        %1166 = vst [vmem:[%s320 + $0x28] sm:$0xff] %v1150
        %1167 = vst [vmem:[%s320 + $0x30] sm:$0xff] %v1151
        %1168 = vst [vmem:[%s320 + $0x38] sm:$0xff] %v1152
        %1169 = vst [vmem:[%s320 + $0x40] sm:$0xff] %v1153
        %1170 = vst [vmem:[%s320 + $0x48] sm:$0xff] %v1154
        %1171 = vst [vmem:[%s320 + $0x50] sm:$0xff] %v1155
        %1172 = vst [vmem:[%s320 + $0x58] sm:$0xff] %v1156
        %1173 = vst [vmem:[%s320 + $0x60] sm:$0xff] %v1157
        %1174 = vst [vmem:[%s320 + $0x68] sm:$0xff] %v1158
        %1175 = vst [vmem:[%s320 + $0x70] sm:$0xff] %v1159
        %1176 = vst [vmem:[%s320 + $0x78] sm:$0xff] %v1160
        %s1177 = sand.u32 %s147, 1
        %s1178 = sand.u32 %s147, 1
        %s1179 = smul.addr %s1178, 128
        %s1180 = scalar_lea.vmem [#allocation7], %s1179
        // Predicated region
        $region49: #{forward.4} parent=35 // pred_check
          %p1181 = pneg %p157
        $region50: #{forward.4} parent=35 // pred_check_branch
          %1183 = sbr.rel (%p1181) target = $region52
        $region51: #{forward.4} parent=35 // pred_region
          %s1184 = smul.u32 8, %s25
          %s1185 = smul.u32 4, %s26
          %s1186 = smul.addr %s1184, 28
          %s1187 = sadd.s32 %s1185, %s1186
          %s1188 = smul.addr %s1187, 4
          %s1189 = scalar_lea.vmem %s4, %s1188
          // Predicated region
          $region53: #{forward.4} parent=51 // pred_check
            _
          $region54: #{forward.4} parent=51 // pred_check_branch
            %1191 = sbr.rel (0) target = $region56
          $region55: #{forward.4} parent=51 // pred_region
            // Predicated region
            $region57: #{forward.4} parent=55 // pred_check
              _
            $region58: #{forward.4} parent=55 // pred_check_branch
              %1193 = sbr.rel (0) target = $region60
            $region59: #{forward.4} parent=55 // pred_region
              loop: start=0, step=1, limit=1
              $region61: #{forward.4} parent=59 // loop_pre_header
                _
              $region62: #{forward.4} parent=59 // loop_header
                %s1195 = sphi 0, %s1199
                %p1196 = scmp.ge.s32.totalorder %s1195, 1
                %s1200 = sphi %s1180, %s1180
                %s1201 = sphi %s1189, %s1189
              $region63: #{forward.4} parent=59 // loop_header_branch
                %1198 = sbr.rel (%p1196) target = $region67
              $region64: #{forward.4} parent=59 // loop_body
                %v1202 = vld [vmem:[%s1200] sm:$0xff]
                %1203 = vst [vmem:[%s1201] sm:$0xff] %v1202
                %v1204 = vld [vmem:[%s1200 + $0x8] sm:$0xff]
                %1205 = vst [vmem:[%s1201 + $0x8] sm:$0xff] %v1204
                %v1206 = vld [vmem:[%s1200 + $0x10] sm:$0xff]
                %1207 = vst [vmem:[%s1201 + $0x70] sm:$0xff] %v1206
                %v1208 = vld [vmem:[%s1200 + $0x18] sm:$0xff]
                %1209 = vst [vmem:[%s1201 + $0x78] sm:$0xff] %v1208
                %v1210 = vld [vmem:[%s1200 + $0x20] sm:$0xff]
                %1211 = vst [vmem:[%s1201 + $0xe0] sm:$0xff] %v1210
                %v1212 = vld [vmem:[%s1200 + $0x28] sm:$0xff]
                %1213 = vst [vmem:[%s1201 + $0xe8] sm:$0xff] %v1212
                %v1214 = vld [vmem:[%s1200 + $0x30] sm:$0xff]
                %1215 = vst [vmem:[%s1201 + $0x150] sm:$0xff] %v1214
                %v1216 = vld [vmem:[%s1200 + $0x38] sm:$0xff]
                %1217 = vst [vmem:[%s1201 + $0x158] sm:$0xff] %v1216
                %v1218 = vld [vmem:[%s1200 + $0x40] sm:$0xff]
                %1219 = vst [vmem:[%s1201 + $0x1c0] sm:$0xff] %v1218
                %v1220 = vld [vmem:[%s1200 + $0x48] sm:$0xff]
                %1221 = vst [vmem:[%s1201 + $0x1c8] sm:$0xff] %v1220
                %v1222 = vld [vmem:[%s1200 + $0x50] sm:$0xff]
                %1223 = vst [vmem:[%s1201 + $0x230] sm:$0xff] %v1222
                %v1224 = vld [vmem:[%s1200 + $0x58] sm:$0xff]
                %1225 = vst [vmem:[%s1201 + $0x238] sm:$0xff] %v1224
                %v1226 = vld [vmem:[%s1200 + $0x60] sm:$0xff]
                %1227 = vst [vmem:[%s1201 + $0x2a0] sm:$0xff] %v1226
                %v1228 = vld [vmem:[%s1200 + $0x68] sm:$0xff]
                %1229 = vst [vmem:[%s1201 + $0x2a8] sm:$0xff] %v1228
                %v1230 = vld [vmem:[%s1200 + $0x70] sm:$0xff]
                %1231 = vst [vmem:[%s1201 + $0x310] sm:$0xff] %v1230
                %v1232 = vld [vmem:[%s1200 + $0x78] sm:$0xff]
                %1233 = vst [vmem:[%s1201 + $0x318] sm:$0xff] %v1232
              $region65: #{forward.4} parent=59 // loop_footer
                %s1199 = sadd.s32 1, %s1195
              $region66: #{forward.4} parent=59 // loop_footer_branch
                %1194 = sbr.rel target = $region62
              $region67: #{forward.4} parent=59 // loop_exit
                _
            $region60: #{forward.4} parent=55 // pred_fallthru
              _
            // Predicated region
            $region68: #{forward.4} parent=55 // pred_check
              _
            $region69: #{forward.4} parent=55 // pred_check_branch
              %1235 = sbr.rel target = $region71
            $region70: #{forward.4} parent=55 // pred_region
              _
            $region71: #{forward.4} parent=55 // pred_fallthru
              _
          $region56: #{forward.4} parent=51 // pred_fallthru
            _
          %1236 = vnop
        $region52: #{forward.4} parent=35 // pred_fallthru
          _
      $region36: #{forward.4} parent=5 // pred_fallthru
        _
      %p1237 = scmp.le.s32.totalorder 2, %s16
      // Predicated region
      $region72: #{forward.4} parent=5 // pred_check
        %p1238 = pneg %p1237
      $region73: #{forward.4} parent=5 // pred_check_branch
        %1240 = sbr.rel (%p1238) target = $region75
      $region74: #{forward.4} parent=5 // pred_region
        %s1241 = ssub.s32 %s16, 2
        // Predicated region
        $region76: #{forward.4} parent=74 // pred_check
          %p1242 = pneg %p163
        $region77: #{forward.4} parent=74 // pred_check_branch
          %1244 = sbr.rel (%p1242) target = $region79
        $region78: #{forward.4} parent=74 // pred_region
          %s1245 = sand.u32 %s148, 1
          %s1246 = sand.u32 %s148, 1
          %s1247 = smul.addr %s1246, 128
          %s1248 = scalar_lea.vmem [#allocation7], %s1247
        $region79: #{forward.4} parent=74 // pred_fallthru
          _
      $region75: #{forward.4} parent=5 // pred_fallthru
        _
    $region6: #{forward.4} parent=1 // loop_footer
      %s20 = sadd.s32 1, %s16
    $region7: #{forward.4} parent=1 // loop_footer_branch
      %15 = sbr.rel target = $region3
    $region8: #{forward.4} parent=1 // loop_exit
      _
    %1249 = vsyncpa [#allocation3], 1
    %s1250 = scalar_lea.sflag [#allocation3], 1
    %1251 = vsyncpa %s1250, 1
    %1252 = vsyncpa [#allocation5], 1
    %s1253 = scalar_lea.sflag [#allocation5], 1
    %1254 = vsyncpa %s1253, 1

// kernel: forward.5
$region0: #{forward.5}
  #allocation0 [shape = 'u32[]', space=smem, size = 0x4, offset = 0x4, fixed_abs, tag = 'smem constant byte address 0x4 - core index']
  #allocation1 [shape = 'u32[72,128]{1,0:T(1,128)}', space=vmem, size = 0x9000, scoped, tag = 'internal scratch']
  %s0 = inlined_call_operand.vmem [shape: bf16[4,392,128], index: 0, kind: input, shape index: {}]
  %s1 = inlined_call_operand.vmem [shape: bf16[392,128], index: 1, kind: output, shape index: {}]
  %s2 = sld [smem:[#allocation0]]
  $region14: #{forward.5} parent=0
    _
  %s4 = ssub.s32 1, %s2
  %s5 = scalar_select 0, %s4, %s2
  // Predicated region
  $region2: #{forward.5} parent=0 // pred_check
    _
  $region3: #{forward.5} parent=0 // pred_check_branch
    %7 = sbr.rel (0) target = $region5
  $region4: #{forward.5} parent=0 // pred_region
    _
  $region5: #{forward.5} parent=0 // pred_fallthru
    _
  %v8 = vld [vmem:[%s0] sm:$0xf]
  %v9 = vld [vmem:[%s0 + $0x4] sm:$0xf]
  %v10 = vld [vmem:[%s0 + $0x8] sm:$0xf]
  %v11 = vld [vmem:[%s0 + $0xc] sm:$0xf]
  %v12 = vld [vmem:[%s0 + $0x10] sm:$0xf]
  %v13 = vld [vmem:[%s0 + $0x14] sm:$0xf]
  %v14 = vld [vmem:[%s0 + $0x18] sm:$0xf]
  %v15 = vld [vmem:[%s0 + $0x1c] sm:$0xf]
  %v16 = vld [vmem:[%s0 + $0x20] sm:$0xf]
  %v17 = vld [vmem:[%s0 + $0x24] sm:$0xf]
  %v18 = vld [vmem:[%s0 + $0x28] sm:$0xf]
  %v19 = vld [vmem:[%s0 + $0x2c] sm:$0xf]
  %v20 = vld [vmem:[%s0 + $0x30] sm:$0xf]
  %v21 = vld [vmem:[%s0 + $0x34] sm:$0xf]
  %v22 = vld [vmem:[%s0 + $0x38] sm:$0xf]
  %v23 = vld [vmem:[%s0 + $0x3c] sm:$0xf]
  %v24 = vld [vmem:[%s0 + $0x40] sm:$0xf]
  %v25 = vld [vmem:[%s0 + $0x44] sm:$0xf]
  %v26 = vld [vmem:[%s0 + $0x48] sm:$0xf]
  %v27 = vld [vmem:[%s0 + $0x4c] sm:$0xf]
  %v28 = vld [vmem:[%s0 + $0x50] sm:$0xf]
  %v29 = vld [vmem:[%s0 + $0x54] sm:$0xf]
  %v30 = vld [vmem:[%s0 + $0x58] sm:$0xf]
  %v31 = vld [vmem:[%s0 + $0x5c] sm:$0xf]
  %v32 = vld [vmem:[%s0 + $0x60] sm:$0xf]
  %v33 = vld [vmem:[%s0 + $0x64] sm:$0xf]
  %v34 = vld [vmem:[%s0 + $0x68] sm:$0xf]
  %v35 = vld [vmem:[%s0 + $0x6c] sm:$0xf]
  %v36 = vld [vmem:[%s0 + $0x70] sm:$0xf]
  %v37 = vld [vmem:[%s0 + $0x74] sm:$0xf]
  %v38 = vld [vmem:[%s0 + $0x78] sm:$0xf]
  %v39 = vld [vmem:[%s0 + $0x7c] sm:$0xf]
  %v40 = vld [vmem:[%s0 + $0x80] sm:$0xf]
  %v41 = vld [vmem:[%s0 + $0x84] sm:$0xf]
  %v42 = vld [vmem:[%s0 + $0x88] sm:$0xf]
  %v43 = vld [vmem:[%s0 + $0x8c] sm:$0xf]
  %v44 = vld [vmem:[%s0 + $0x90] sm:$0xf]
  %v45 = vld [vmem:[%s0 + $0x94] sm:$0xf]
  %v46 = vld [vmem:[%s0 + $0x98] sm:$0xf]
  %v47 = vld [vmem:[%s0 + $0x9c] sm:$0xf]
  %v48 = vld [vmem:[%s0 + $0xa0] sm:$0xf]
  %v49 = vld [vmem:[%s0 + $0xa4] sm:$0xf]
  %v50 = vld [vmem:[%s0 + $0xa8] sm:$0xf]
  %v51 = vld [vmem:[%s0 + $0xac] sm:$0xf]
  %v52 = vld [vmem:[%s0 + $0xb0] sm:$0xf]
  %v53 = vld [vmem:[%s0 + $0xb4] sm:$0xf]
  %v54 = vld [vmem:[%s0 + $0xb8] sm:$0xf]
  %v55 = vld [vmem:[%s0 + $0xbc] sm:$0xf]
  %v56 = vld [vmem:[%s0 + $0xc0] sm:$0xf]
  %s57 = scalar_lea.vmem %s0, 196
  %v58 = vld [vmem:[%s57] sm:$0xf]
  %v59 = vld [vmem:[%s57 + $0x4] sm:$0xf]
  %v60 = vld [vmem:[%s57 + $0x8] sm:$0xf]
  %v61 = vld [vmem:[%s57 + $0xc] sm:$0xf]
  %v62 = vld [vmem:[%s57 + $0x10] sm:$0xf]
  %v63 = vld [vmem:[%s57 + $0x14] sm:$0xf]
  %v64 = vld [vmem:[%s57 + $0x18] sm:$0xf]
  %v65 = vld [vmem:[%s57 + $0x1c] sm:$0xf]
  %v66 = vld [vmem:[%s57 + $0x20] sm:$0xf]
  %v67 = vld [vmem:[%s57 + $0x24] sm:$0xf]
  %v68 = vld [vmem:[%s57 + $0x28] sm:$0xf]
  %v69 = vld [vmem:[%s57 + $0x2c] sm:$0xf]
  %v70 = vld [vmem:[%s57 + $0x30] sm:$0xf]
  %v71 = vld [vmem:[%s57 + $0x34] sm:$0xf]
  %v72 = vld [vmem:[%s57 + $0x38] sm:$0xf]
  %v73 = vld [vmem:[%s57 + $0x3c] sm:$0xf]
  %v74 = vld [vmem:[%s57 + $0x40] sm:$0xf]
  %v75 = vld [vmem:[%s57 + $0x44] sm:$0xf]
  %v76 = vld [vmem:[%s57 + $0x48] sm:$0xf]
  %v77 = vld [vmem:[%s57 + $0x4c] sm:$0xf]
  %v78 = vld [vmem:[%s57 + $0x50] sm:$0xf]
  %v79 = vld [vmem:[%s57 + $0x54] sm:$0xf]
  %v80 = vld [vmem:[%s57 + $0x58] sm:$0xf]
  %v81 = vld [vmem:[%s57 + $0x5c] sm:$0xf]
  %v82 = vld [vmem:[%s57 + $0x60] sm:$0xf]
  %v83 = vld [vmem:[%s57 + $0x64] sm:$0xf]
  %v84 = vld [vmem:[%s57 + $0x68] sm:$0xf]
  %v85 = vld [vmem:[%s57 + $0x6c] sm:$0xf]
  %v86 = vld [vmem:[%s57 + $0x70] sm:$0xf]
  %v87 = vld [vmem:[%s57 + $0x74] sm:$0xf]
  %v88 = vld [vmem:[%s57 + $0x78] sm:$0xf]
  %v89 = vld [vmem:[%s57 + $0x7c] sm:$0xf]
  %v90 = vld [vmem:[%s57 + $0x80] sm:$0xf]
  %v91 = vld [vmem:[%s57 + $0x84] sm:$0xf]
  %v92 = vld [vmem:[%s57 + $0x88] sm:$0xf]
  %v93 = vld [vmem:[%s57 + $0x8c] sm:$0xf]
  %v94 = vld [vmem:[%s57 + $0x90] sm:$0xf]
  %v95 = vld [vmem:[%s57 + $0x94] sm:$0xf]
  %v96 = vld [vmem:[%s57 + $0x98] sm:$0xf]
  %v97 = vld [vmem:[%s57 + $0x9c] sm:$0xf]
  %v98 = vld [vmem:[%s57 + $0xa0] sm:$0xf]
  %v99 = vld [vmem:[%s57 + $0xa4] sm:$0xf]
  %v100 = vld [vmem:[%s57 + $0xa8] sm:$0xf]
  %v101 = vld [vmem:[%s57 + $0xac] sm:$0xf]
  %v102 = vld [vmem:[%s57 + $0xb0] sm:$0xf]
  %v103 = vld [vmem:[%s57 + $0xb4] sm:$0xf]
  %v104 = vld [vmem:[%s57 + $0xb8] sm:$0xf]
  %v105 = vld [vmem:[%s57 + $0xbc] sm:$0xf]
  %v106 = vld [vmem:[%s57 + $0xc0] sm:$0xf]
  %v107 = vunpack.c.l.bf16 %v8
  %v108 = vunpack.c.l.bf16 %v9
  %v109 = vunpack.c.l.bf16 %v10
  %v110 = vunpack.c.l.bf16 %v11
  %v111 = vunpack.c.l.bf16 %v12
  %v112 = vunpack.c.l.bf16 %v13
  %v113 = vunpack.c.l.bf16 %v14
  %v114 = vunpack.c.l.bf16 %v15
  %v115 = vunpack.c.l.bf16 %v16
  %v116 = vunpack.c.l.bf16 %v17
  %v117 = vunpack.c.l.bf16 %v18
  %v118 = vunpack.c.l.bf16 %v19
  %v119 = vunpack.c.l.bf16 %v20
  %v120 = vunpack.c.l.bf16 %v21
  %v121 = vunpack.c.l.bf16 %v22
  %v122 = vunpack.c.l.bf16 %v23
  %v123 = vunpack.c.l.bf16 %v24
  %v124 = vunpack.c.l.bf16 %v25
  %v125 = vunpack.c.l.bf16 %v26
  %v126 = vunpack.c.l.bf16 %v27
  %v127 = vunpack.c.l.bf16 %v28
  %v128 = vunpack.c.l.bf16 %v29
  %v129 = vunpack.c.l.bf16 %v30
  %v130 = vunpack.c.l.bf16 %v31
  %v131 = vunpack.c.l.bf16 %v32
  %v132 = vunpack.c.l.bf16 %v33
  %v133 = vunpack.c.l.bf16 %v34
  %v134 = vunpack.c.l.bf16 %v35
  %v135 = vunpack.c.l.bf16 %v36
  %v136 = vunpack.c.l.bf16 %v37
  %v137 = vunpack.c.l.bf16 %v38
  %v138 = vunpack.c.l.bf16 %v39
  %v139 = vunpack.c.l.bf16 %v40
  %v140 = vunpack.c.l.bf16 %v41
  %v141 = vunpack.c.l.bf16 %v42
  %v142 = vunpack.c.l.bf16 %v43
  %v143 = vunpack.c.l.bf16 %v44
  %v144 = vunpack.c.l.bf16 %v45
  %v145 = vunpack.c.l.bf16 %v46
  %v146 = vunpack.c.l.bf16 %v47
  %v147 = vunpack.c.l.bf16 %v48
  %v148 = vunpack.c.l.bf16 %v49
  %v149 = vunpack.c.l.bf16 %v50
  %v150 = vunpack.c.l.bf16 %v51
  %v151 = vunpack.c.l.bf16 %v52
  %v152 = vunpack.c.l.bf16 %v53
  %v153 = vunpack.c.l.bf16 %v54
  %v154 = vunpack.c.l.bf16 %v55
  %v155 = vunpack.c.l.bf16 %v56
  %v156 = vunpack.c.l.bf16 %v58
  %v157 = vunpack.c.l.bf16 %v59
  %v158 = vunpack.c.l.bf16 %v60
  %v159 = vunpack.c.l.bf16 %v61
  %v160 = vunpack.c.l.bf16 %v62
  %v161 = vunpack.c.l.bf16 %v63
  %v162 = vunpack.c.l.bf16 %v64
  %v163 = vunpack.c.l.bf16 %v65
  %v164 = vunpack.c.l.bf16 %v66
  %v165 = vunpack.c.l.bf16 %v67
  %v166 = vunpack.c.l.bf16 %v68
  %v167 = vunpack.c.l.bf16 %v69
  %v168 = vunpack.c.l.bf16 %v70
  %v169 = vunpack.c.l.bf16 %v71
  %v170 = vunpack.c.l.bf16 %v72
  %v171 = vunpack.c.l.bf16 %v73
  %v172 = vunpack.c.l.bf16 %v74
  %v173 = vunpack.c.l.bf16 %v75
  %v174 = vunpack.c.l.bf16 %v76
  %v175 = vunpack.c.l.bf16 %v77
  %v176 = vunpack.c.l.bf16 %v78
  %v177 = vunpack.c.l.bf16 %v79
  %v178 = vunpack.c.l.bf16 %v80
  %v179 = vunpack.c.l.bf16 %v81
  %v180 = vunpack.c.l.bf16 %v82
  %v181 = vunpack.c.l.bf16 %v83
  %v182 = vunpack.c.l.bf16 %v84
  %v183 = vunpack.c.l.bf16 %v85
  %v184 = vunpack.c.l.bf16 %v86
  %v185 = vunpack.c.l.bf16 %v87
  %v186 = vunpack.c.l.bf16 %v88
  %v187 = vunpack.c.l.bf16 %v89
  %v188 = vunpack.c.l.bf16 %v90
  %v189 = vunpack.c.l.bf16 %v91
  %v190 = vunpack.c.l.bf16 %v92
  %v191 = vunpack.c.l.bf16 %v93
  %v192 = vunpack.c.l.bf16 %v94
  %v193 = vunpack.c.l.bf16 %v95
  %v194 = vunpack.c.l.bf16 %v96
  %v195 = vunpack.c.l.bf16 %v97
  %v196 = vunpack.c.l.bf16 %v98
  %v197 = vunpack.c.l.bf16 %v99
  %v198 = vunpack.c.l.bf16 %v100
  %v199 = vunpack.c.l.bf16 %v101
  %v200 = vunpack.c.l.bf16 %v102
  %v201 = vunpack.c.l.bf16 %v103
  %v202 = vunpack.c.l.bf16 %v104
  %v203 = vunpack.c.l.bf16 %v105
  %v204 = vunpack.c.l.bf16 %v106
  %v205 = vmax.f32 %v107, %v156
  %v206 = vmax.f32 %v108, %v157
  %v207 = vmax.f32 %v109, %v158
  %v208 = vmax.f32 %v110, %v159
  %v209 = vmax.f32 %v111, %v160
  %v210 = vmax.f32 %v112, %v161
  %v211 = vmax.f32 %v113, %v162
  %v212 = vmax.f32 %v114, %v163
  %v213 = vmax.f32 %v115, %v164
  %v214 = vmax.f32 %v116, %v165
  %v215 = vmax.f32 %v117, %v166
  %v216 = vmax.f32 %v118, %v167
  %v217 = vmax.f32 %v119, %v168
  %v218 = vmax.f32 %v120, %v169
  %v219 = vmax.f32 %v121, %v170
  %v220 = vmax.f32 %v122, %v171
  %v221 = vmax.f32 %v123, %v172
  %v222 = vmax.f32 %v124, %v173
  %v223 = vmax.f32 %v125, %v174
  %v224 = vmax.f32 %v126, %v175
  %v225 = vmax.f32 %v127, %v176
  %v226 = vmax.f32 %v128, %v177
  %v227 = vmax.f32 %v129, %v178
  %v228 = vmax.f32 %v130, %v179
  %v229 = vmax.f32 %v131, %v180
  %v230 = vmax.f32 %v132, %v181
  %v231 = vmax.f32 %v133, %v182
  %v232 = vmax.f32 %v134, %v183
  %v233 = vmax.f32 %v135, %v184
  %v234 = vmax.f32 %v136, %v185
  %v235 = vmax.f32 %v137, %v186
  %v236 = vmax.f32 %v138, %v187
  %v237 = vmax.f32 %v139, %v188
  %v238 = vmax.f32 %v140, %v189
  %v239 = vmax.f32 %v141, %v190
  %v240 = vmax.f32 %v142, %v191
  %v241 = vmax.f32 %v143, %v192
  %v242 = vmax.f32 %v144, %v193
  %v243 = vmax.f32 %v145, %v194
  %v244 = vmax.f32 %v146, %v195
  %v245 = vmax.f32 %v147, %v196
  %v246 = vmax.f32 %v148, %v197
  %v247 = vmax.f32 %v149, %v198
  %v248 = vmax.f32 %v150, %v199
  %v249 = vmax.f32 %v151, %v200
  %v250 = vmax.f32 %v152, %v201
  %v251 = vmax.f32 %v153, %v202
  %v252 = vmax.f32 %v154, %v203
  %v253 = vmax.f32 %v155, %v204
  %v254 = vpack.c.bf16 %v205, %v205
  %v255 = vpack.c.bf16 %v206, %v206
  %v256 = vpack.c.bf16 %v207, %v207
  %v257 = vpack.c.bf16 %v208, %v208
  %v258 = vpack.c.bf16 %v209, %v209
  %v259 = vpack.c.bf16 %v210, %v210
  %v260 = vpack.c.bf16 %v211, %v211
  %v261 = vpack.c.bf16 %v212, %v212
  %v262 = vpack.c.bf16 %v213, %v213
  %v263 = vpack.c.bf16 %v214, %v214
  %v264 = vpack.c.bf16 %v215, %v215
  %v265 = vpack.c.bf16 %v216, %v216
  %v266 = vpack.c.bf16 %v217, %v217
  %v267 = vpack.c.bf16 %v218, %v218
  %v268 = vpack.c.bf16 %v219, %v219
  %v269 = vpack.c.bf16 %v220, %v220
  %v270 = vpack.c.bf16 %v221, %v221
  %v271 = vpack.c.bf16 %v222, %v222
  %v272 = vpack.c.bf16 %v223, %v223
  %v273 = vpack.c.bf16 %v224, %v224
  %v274 = vpack.c.bf16 %v225, %v225
  %v275 = vpack.c.bf16 %v226, %v226
  %v276 = vpack.c.bf16 %v227, %v227
  %v277 = vpack.c.bf16 %v228, %v228
  %v278 = vpack.c.bf16 %v229, %v229
  %v279 = vpack.c.bf16 %v230, %v230
  %v280 = vpack.c.bf16 %v231, %v231
  %v281 = vpack.c.bf16 %v232, %v232
  %v282 = vpack.c.bf16 %v233, %v233
  %v283 = vpack.c.bf16 %v234, %v234
  %v284 = vpack.c.bf16 %v235, %v235
  %v285 = vpack.c.bf16 %v236, %v236
  %v286 = vpack.c.bf16 %v237, %v237
  %v287 = vpack.c.bf16 %v238, %v238
  %v288 = vpack.c.bf16 %v239, %v239
  %v289 = vpack.c.bf16 %v240, %v240
  %v290 = vpack.c.bf16 %v241, %v241
  %v291 = vpack.c.bf16 %v242, %v242
  %v292 = vpack.c.bf16 %v243, %v243
  %v293 = vpack.c.bf16 %v244, %v244
  %v294 = vpack.c.bf16 %v245, %v245
  %v295 = vpack.c.bf16 %v246, %v246
  %v296 = vpack.c.bf16 %v247, %v247
  %v297 = vpack.c.bf16 %v248, %v248
  %v298 = vpack.c.bf16 %v249, %v249
  %v299 = vpack.c.bf16 %v250, %v250
  %v300 = vpack.c.bf16 %v251, %v251
  %v301 = vpack.c.bf16 %v252, %v252
  %v302 = vpack.c.bf16 %v253, %v253
  %s303 = scalar_lea.vmem %s0, 392
  %v304 = vld [vmem:[%s303] sm:$0xf]
  %v305 = vld [vmem:[%s303 + $0x4] sm:$0xf]
  %v306 = vld [vmem:[%s303 + $0x8] sm:$0xf]
  %v307 = vld [vmem:[%s303 + $0xc] sm:$0xf]
  %v308 = vld [vmem:[%s303 + $0x10] sm:$0xf]
  %v309 = vld [vmem:[%s303 + $0x14] sm:$0xf]
  %v310 = vld [vmem:[%s303 + $0x18] sm:$0xf]
  %v311 = vld [vmem:[%s303 + $0x1c] sm:$0xf]
  %v312 = vld [vmem:[%s303 + $0x20] sm:$0xf]
  %v313 = vld [vmem:[%s303 + $0x24] sm:$0xf]
  %v314 = vld [vmem:[%s303 + $0x28] sm:$0xf]
  %v315 = vld [vmem:[%s303 + $0x2c] sm:$0xf]
  %v316 = vld [vmem:[%s303 + $0x30] sm:$0xf]
  %v317 = vld [vmem:[%s303 + $0x34] sm:$0xf]
  %v318 = vld [vmem:[%s303 + $0x38] sm:$0xf]
  %v319 = vld [vmem:[%s303 + $0x3c] sm:$0xf]
  %v320 = vld [vmem:[%s303 + $0x40] sm:$0xf]
  %v321 = vld [vmem:[%s303 + $0x44] sm:$0xf]
  %v322 = vld [vmem:[%s303 + $0x48] sm:$0xf]
  %v323 = vld [vmem:[%s303 + $0x4c] sm:$0xf]
  %v324 = vld [vmem:[%s303 + $0x50] sm:$0xf]
  %v325 = vld [vmem:[%s303 + $0x54] sm:$0xf]
  %v326 = vld [vmem:[%s303 + $0x58] sm:$0xf]
  %v327 = vld [vmem:[%s303 + $0x5c] sm:$0xf]
  %v328 = vld [vmem:[%s303 + $0x60] sm:$0xf]
  %v329 = vld [vmem:[%s303 + $0x64] sm:$0xf]
  %v330 = vld [vmem:[%s303 + $0x68] sm:$0xf]
  %v331 = vld [vmem:[%s303 + $0x6c] sm:$0xf]
  %v332 = vld [vmem:[%s303 + $0x70] sm:$0xf]
  %v333 = vld [vmem:[%s303 + $0x74] sm:$0xf]
  %v334 = vld [vmem:[%s303 + $0x78] sm:$0xf]
  %v335 = vld [vmem:[%s303 + $0x7c] sm:$0xf]
  %v336 = vld [vmem:[%s303 + $0x80] sm:$0xf]
  %v337 = vld [vmem:[%s303 + $0x84] sm:$0xf]
  %v338 = vld [vmem:[%s303 + $0x88] sm:$0xf]
  %v339 = vld [vmem:[%s303 + $0x8c] sm:$0xf]
  %v340 = vld [vmem:[%s303 + $0x90] sm:$0xf]
  %v341 = vld [vmem:[%s303 + $0x94] sm:$0xf]
  %v342 = vld [vmem:[%s303 + $0x98] sm:$0xf]
  %v343 = vld [vmem:[%s303 + $0x9c] sm:$0xf]
  %v344 = vld [vmem:[%s303 + $0xa0] sm:$0xf]
  %v345 = vld [vmem:[%s303 + $0xa4] sm:$0xf]
  %v346 = vld [vmem:[%s303 + $0xa8] sm:$0xf]
  %v347 = vld [vmem:[%s303 + $0xac] sm:$0xf]
  %v348 = vld [vmem:[%s303 + $0xb0] sm:$0xf]
  %v349 = vld [vmem:[%s303 + $0xb4] sm:$0xf]
  %v350 = vld [vmem:[%s303 + $0xb8] sm:$0xf]
  %v351 = vld [vmem:[%s303 + $0xbc] sm:$0xf]
  %v352 = vld [vmem:[%s303 + $0xc0] sm:$0xf]
  %s353 = scalar_lea.vmem %s0, 588
  %v354 = vld [vmem:[%s353] sm:$0xf]
  %v355 = vld [vmem:[%s353 + $0x4] sm:$0xf]
  %v356 = vld [vmem:[%s353 + $0x8] sm:$0xf]
  %v357 = vld [vmem:[%s353 + $0xc] sm:$0xf]
  %v358 = vld [vmem:[%s353 + $0x10] sm:$0xf]
  %v359 = vld [vmem:[%s353 + $0x14] sm:$0xf]
  %v360 = vld [vmem:[%s353 + $0x18] sm:$0xf]
  %v361 = vld [vmem:[%s353 + $0x1c] sm:$0xf]
  %v362 = vld [vmem:[%s353 + $0x20] sm:$0xf]
  %v363 = vld [vmem:[%s353 + $0x24] sm:$0xf]
  %v364 = vld [vmem:[%s353 + $0x28] sm:$0xf]
  %v365 = vld [vmem:[%s353 + $0x2c] sm:$0xf]
  %v366 = vld [vmem:[%s353 + $0x30] sm:$0xf]
  %v367 = vld [vmem:[%s353 + $0x34] sm:$0xf]
  %v368 = vld [vmem:[%s353 + $0x38] sm:$0xf]
  %v369 = vld [vmem:[%s353 + $0x3c] sm:$0xf]
  %v370 = vld [vmem:[%s353 + $0x40] sm:$0xf]
  %v371 = vld [vmem:[%s353 + $0x44] sm:$0xf]
  %v372 = vld [vmem:[%s353 + $0x48] sm:$0xf]
  %v373 = vld [vmem:[%s353 + $0x4c] sm:$0xf]
  %v374 = vld [vmem:[%s353 + $0x50] sm:$0xf]
  %v375 = vld [vmem:[%s353 + $0x54] sm:$0xf]
  %v376 = vld [vmem:[%s353 + $0x58] sm:$0xf]
  %v377 = vld [vmem:[%s353 + $0x5c] sm:$0xf]
  %v378 = vld [vmem:[%s353 + $0x60] sm:$0xf]
  %v379 = vld [vmem:[%s353 + $0x64] sm:$0xf]
  %v380 = vld [vmem:[%s353 + $0x68] sm:$0xf]
  %v381 = vld [vmem:[%s353 + $0x6c] sm:$0xf]
  %v382 = vld [vmem:[%s353 + $0x70] sm:$0xf]
  %v383 = vld [vmem:[%s353 + $0x74] sm:$0xf]
  %v384 = vld [vmem:[%s353 + $0x78] sm:$0xf]
  %v385 = vld [vmem:[%s353 + $0x7c] sm:$0xf]
  %v386 = vld [vmem:[%s353 + $0x80] sm:$0xf]
  %v387 = vld [vmem:[%s353 + $0x84] sm:$0xf]
  %v388 = vld [vmem:[%s353 + $0x88] sm:$0xf]
  %v389 = vld [vmem:[%s353 + $0x8c] sm:$0xf]
  %v390 = vld [vmem:[%s353 + $0x90] sm:$0xf]
  %v391 = vld [vmem:[%s353 + $0x94] sm:$0xf]
  %v392 = vld [vmem:[%s353 + $0x98] sm:$0xf]
  %v393 = vld [vmem:[%s353 + $0x9c] sm:$0xf]
  %v394 = vld [vmem:[%s353 + $0xa0] sm:$0xf]
  %v395 = vld [vmem:[%s353 + $0xa4] sm:$0xf]
  %v396 = vld [vmem:[%s353 + $0xa8] sm:$0xf]
  %v397 = vld [vmem:[%s353 + $0xac] sm:$0xf]
  %v398 = vld [vmem:[%s353 + $0xb0] sm:$0xf]
  %v399 = vld [vmem:[%s353 + $0xb4] sm:$0xf]
  %v400 = vld [vmem:[%s353 + $0xb8] sm:$0xf]
  %v401 = vld [vmem:[%s353 + $0xbc] sm:$0xf]
  %v402 = vld [vmem:[%s353 + $0xc0] sm:$0xf]
  %v403 = vunpack.c.l.bf16 %v304
  %v404 = vunpack.c.l.bf16 %v305
  %v405 = vunpack.c.l.bf16 %v306
  %v406 = vunpack.c.l.bf16 %v307
  %v407 = vunpack.c.l.bf16 %v308
  %v408 = vunpack.c.l.bf16 %v309
  %v409 = vunpack.c.l.bf16 %v310
  %v410 = vunpack.c.l.bf16 %v311
  %v411 = vunpack.c.l.bf16 %v312
  %v412 = vunpack.c.l.bf16 %v313
  %v413 = vunpack.c.l.bf16 %v314
  %v414 = vunpack.c.l.bf16 %v315
  %v415 = vunpack.c.l.bf16 %v316
  %v416 = vunpack.c.l.bf16 %v317
  %v417 = vunpack.c.l.bf16 %v318
  %v418 = vunpack.c.l.bf16 %v319
  %v419 = vunpack.c.l.bf16 %v320
  %v420 = vunpack.c.l.bf16 %v321
  %v421 = vunpack.c.l.bf16 %v322
  %v422 = vunpack.c.l.bf16 %v323
  %v423 = vunpack.c.l.bf16 %v324
  %v424 = vunpack.c.l.bf16 %v325
  %v425 = vunpack.c.l.bf16 %v326
  %v426 = vunpack.c.l.bf16 %v327
  %v427 = vunpack.c.l.bf16 %v328
  %v428 = vunpack.c.l.bf16 %v329
  %v429 = vunpack.c.l.bf16 %v330
  %v430 = vunpack.c.l.bf16 %v331
  %v431 = vunpack.c.l.bf16 %v332
  %v432 = vunpack.c.l.bf16 %v333
  %v433 = vunpack.c.l.bf16 %v334
  %v434 = vunpack.c.l.bf16 %v335
  %v435 = vunpack.c.l.bf16 %v336
  %v436 = vunpack.c.l.bf16 %v337
  %v437 = vunpack.c.l.bf16 %v338
  %v438 = vunpack.c.l.bf16 %v339
  %v439 = vunpack.c.l.bf16 %v340
  %v440 = vunpack.c.l.bf16 %v341
  %v441 = vunpack.c.l.bf16 %v342
  %v442 = vunpack.c.l.bf16 %v343
  %v443 = vunpack.c.l.bf16 %v344
  %v444 = vunpack.c.l.bf16 %v345
  %v445 = vunpack.c.l.bf16 %v346
  %v446 = vunpack.c.l.bf16 %v347
  %v447 = vunpack.c.l.bf16 %v348
  %v448 = vunpack.c.l.bf16 %v349
  %v449 = vunpack.c.l.bf16 %v350
  %v450 = vunpack.c.l.bf16 %v351
  %v451 = vunpack.c.l.bf16 %v352
  %v452 = vunpack.c.l.bf16 %v354
  %v453 = vunpack.c.l.bf16 %v355
  %v454 = vunpack.c.l.bf16 %v356
  %v455 = vunpack.c.l.bf16 %v357
  %v456 = vunpack.c.l.bf16 %v358
  %v457 = vunpack.c.l.bf16 %v359
  %v458 = vunpack.c.l.bf16 %v360
  %v459 = vunpack.c.l.bf16 %v361
  %v460 = vunpack.c.l.bf16 %v362
  %v461 = vunpack.c.l.bf16 %v363
  %v462 = vunpack.c.l.bf16 %v364
  %v463 = vunpack.c.l.bf16 %v365
  %v464 = vunpack.c.l.bf16 %v366
  %v465 = vunpack.c.l.bf16 %v367
  %v466 = vunpack.c.l.bf16 %v368
  %v467 = vunpack.c.l.bf16 %v369
  %v468 = vunpack.c.l.bf16 %v370
  %v469 = vunpack.c.l.bf16 %v371
  %v470 = vunpack.c.l.bf16 %v372
  %v471 = vunpack.c.l.bf16 %v373
  %v472 = vunpack.c.l.bf16 %v374
  %v473 = vunpack.c.l.bf16 %v375
  %v474 = vunpack.c.l.bf16 %v376
  %v475 = vunpack.c.l.bf16 %v377
  %v476 = vunpack.c.l.bf16 %v378
  %v477 = vunpack.c.l.bf16 %v379
  %v478 = vunpack.c.l.bf16 %v380
  %v479 = vunpack.c.l.bf16 %v381
  %v480 = vunpack.c.l.bf16 %v382
  %v481 = vunpack.c.l.bf16 %v383
  %v482 = vunpack.c.l.bf16 %v384
  %v483 = vunpack.c.l.bf16 %v385
  %v484 = vunpack.c.l.bf16 %v386
  %v485 = vunpack.c.l.bf16 %v387
  %v486 = vunpack.c.l.bf16 %v388
  %v487 = vunpack.c.l.bf16 %v389
  %v488 = vunpack.c.l.bf16 %v390
  %v489 = vunpack.c.l.bf16 %v391
  %v490 = vunpack.c.l.bf16 %v392
  %v491 = vunpack.c.l.bf16 %v393
  %v492 = vunpack.c.l.bf16 %v394
  %v493 = vunpack.c.l.bf16 %v395
  %v494 = vunpack.c.l.bf16 %v396
  %v495 = vunpack.c.l.bf16 %v397
  %v496 = vunpack.c.l.bf16 %v398
  %v497 = vunpack.c.l.bf16 %v399
  %v498 = vunpack.c.l.bf16 %v400
  %v499 = vunpack.c.l.bf16 %v401
  %v500 = vunpack.c.l.bf16 %v402
  %v501 = vmax.f32 %v403, %v452
  %v502 = vmax.f32 %v404, %v453
  %v503 = vmax.f32 %v405, %v454
  %v504 = vmax.f32 %v406, %v455
  %v505 = vmax.f32 %v407, %v456
  %v506 = vmax.f32 %v408, %v457
  %v507 = vmax.f32 %v409, %v458
  %v508 = vmax.f32 %v410, %v459
  %v509 = vmax.f32 %v411, %v460
  %v510 = vmax.f32 %v412, %v461
  %v511 = vmax.f32 %v413, %v462
  %v512 = vmax.f32 %v414, %v463
  %v513 = vmax.f32 %v415, %v464
  %v514 = vmax.f32 %v416, %v465
  %v515 = vmax.f32 %v417, %v466
  %v516 = vmax.f32 %v418, %v467
  %v517 = vmax.f32 %v419, %v468
  %v518 = vmax.f32 %v420, %v469
  %v519 = vmax.f32 %v421, %v470
  %v520 = vmax.f32 %v422, %v471
  %v521 = vmax.f32 %v423, %v472
  %v522 = vmax.f32 %v424, %v473
  %v523 = vmax.f32 %v425, %v474
  %v524 = vmax.f32 %v426, %v475
  %v525 = vmax.f32 %v427, %v476
  %v526 = vmax.f32 %v428, %v477
  %v527 = vmax.f32 %v429, %v478
  %v528 = vmax.f32 %v430, %v479
  %v529 = vmax.f32 %v431, %v480
  %v530 = vmax.f32 %v432, %v481
  %v531 = vmax.f32 %v433, %v482
  %v532 = vmax.f32 %v434, %v483
  %v533 = vmax.f32 %v435, %v484
  %v534 = vmax.f32 %v436, %v485
  %v535 = vmax.f32 %v437, %v486
  %v536 = vmax.f32 %v438, %v487
  %v537 = vmax.f32 %v439, %v488
  %v538 = vmax.f32 %v440, %v489
  %v539 = vmax.f32 %v441, %v490
  %v540 = vmax.f32 %v442, %v491
  %v541 = vmax.f32 %v443, %v492
  %v542 = vmax.f32 %v444, %v493
  %v543 = vmax.f32 %v445, %v494
  %v544 = vmax.f32 %v446, %v495
  %v545 = vmax.f32 %v447, %v496
  %v546 = vmax.f32 %v448, %v497
  %v547 = vmax.f32 %v449, %v498
  %v548 = vmax.f32 %v450, %v499
  %v549 = vmax.f32 %v451, %v500
  %v550 = vpack.c.bf16 %v501, %v501
  %v551 = vpack.c.bf16 %v502, %v502
  %v552 = vpack.c.bf16 %v503, %v503
  %v553 = vpack.c.bf16 %v504, %v504
  %v554 = vpack.c.bf16 %v505, %v505
  %v555 = vpack.c.bf16 %v506, %v506
  %v556 = vpack.c.bf16 %v507, %v507
  %v557 = vpack.c.bf16 %v508, %v508
  %v558 = vpack.c.bf16 %v509, %v509
  %v559 = vpack.c.bf16 %v510, %v510
  %v560 = vpack.c.bf16 %v511, %v511
  %v561 = vpack.c.bf16 %v512, %v512
  %v562 = vpack.c.bf16 %v513, %v513
  %v563 = vpack.c.bf16 %v514, %v514
  %v564 = vpack.c.bf16 %v515, %v515
  %v565 = vpack.c.bf16 %v516, %v516
  %v566 = vpack.c.bf16 %v517, %v517
  %v567 = vpack.c.bf16 %v518, %v518
  %v568 = vpack.c.bf16 %v519, %v519
  %v569 = vpack.c.bf16 %v520, %v520
  %v570 = vpack.c.bf16 %v521, %v521
  %v571 = vpack.c.bf16 %v522, %v522
  %v572 = vpack.c.bf16 %v523, %v523
  %v573 = vpack.c.bf16 %v524, %v524
  %v574 = vpack.c.bf16 %v525, %v525
  %v575 = vpack.c.bf16 %v526, %v526
  %v576 = vpack.c.bf16 %v527, %v527
  %v577 = vpack.c.bf16 %v528, %v528
  %v578 = vpack.c.bf16 %v529, %v529
  %v579 = vpack.c.bf16 %v530, %v530
  %v580 = vpack.c.bf16 %v531, %v531
  %v581 = vpack.c.bf16 %v532, %v532
  %v582 = vpack.c.bf16 %v533, %v533
  %v583 = vpack.c.bf16 %v534, %v534
  %v584 = vpack.c.bf16 %v535, %v535
  %v585 = vpack.c.bf16 %v536, %v536
  %v586 = vpack.c.bf16 %v537, %v537
  %v587 = vpack.c.bf16 %v538, %v538
  %v588 = vpack.c.bf16 %v539, %v539
  %v589 = vpack.c.bf16 %v540, %v540
  %v590 = vpack.c.bf16 %v541, %v541
  %v591 = vpack.c.bf16 %v542, %v542
  %v592 = vpack.c.bf16 %v543, %v543
  %v593 = vpack.c.bf16 %v544, %v544
  %v594 = vpack.c.bf16 %v545, %v545
  %v595 = vpack.c.bf16 %v546, %v546
  %v596 = vpack.c.bf16 %v547, %v547
  %v597 = vpack.c.bf16 %v548, %v548
  %v598 = vpack.c.bf16 %v549, %v549
  %v599 = vunpack.c.l.bf16 %v254
  %v600 = vunpack.c.l.bf16 %v255
  %v601 = vunpack.c.l.bf16 %v256
  %v602 = vunpack.c.l.bf16 %v257
  %v603 = vunpack.c.l.bf16 %v258
  %v604 = vunpack.c.l.bf16 %v259
  %v605 = vunpack.c.l.bf16 %v260
  %v606 = vunpack.c.l.bf16 %v261
  %v607 = vunpack.c.l.bf16 %v262
  %v608 = vunpack.c.l.bf16 %v263
  %v609 = vunpack.c.l.bf16 %v264
  %v610 = vunpack.c.l.bf16 %v265
  %v611 = vunpack.c.l.bf16 %v266
  %v612 = vunpack.c.l.bf16 %v267
  %v613 = vunpack.c.l.bf16 %v268
  %v614 = vunpack.c.l.bf16 %v269
  %v615 = vunpack.c.l.bf16 %v270
  %v616 = vunpack.c.l.bf16 %v271
  %v617 = vunpack.c.l.bf16 %v272
  %v618 = vunpack.c.l.bf16 %v273
  %v619 = vunpack.c.l.bf16 %v274
  %v620 = vunpack.c.l.bf16 %v275
  %v621 = vunpack.c.l.bf16 %v276
  %v622 = vunpack.c.l.bf16 %v277
  %v623 = vunpack.c.l.bf16 %v278
  %v624 = vunpack.c.l.bf16 %v279
  %v625 = vunpack.c.l.bf16 %v280
  %v626 = vunpack.c.l.bf16 %v281
  %v627 = vunpack.c.l.bf16 %v282
  %v628 = vunpack.c.l.bf16 %v283
  %v629 = vunpack.c.l.bf16 %v284
  %v630 = vunpack.c.l.bf16 %v285
  %v631 = vunpack.c.l.bf16 %v286
  %v632 = vunpack.c.l.bf16 %v287
  %v633 = vunpack.c.l.bf16 %v288
  %v634 = vunpack.c.l.bf16 %v289
  %v635 = vunpack.c.l.bf16 %v290
  %v636 = vunpack.c.l.bf16 %v291
  %v637 = vunpack.c.l.bf16 %v292
  %v638 = vunpack.c.l.bf16 %v293
  %v639 = vunpack.c.l.bf16 %v294
  %v640 = vunpack.c.l.bf16 %v295
  %v641 = vunpack.c.l.bf16 %v296
  %v642 = vunpack.c.l.bf16 %v297
  %v643 = vunpack.c.l.bf16 %v298
  %v644 = vunpack.c.l.bf16 %v299
  %v645 = vunpack.c.l.bf16 %v300
  %v646 = vunpack.c.l.bf16 %v301
  %v647 = vunpack.c.l.bf16 %v302
  %v648 = vunpack.c.l.bf16 %v550
  %v649 = vunpack.c.l.bf16 %v551
  %v650 = vunpack.c.l.bf16 %v552
  %v651 = vunpack.c.l.bf16 %v553
  %v652 = vunpack.c.l.bf16 %v554
  %v653 = vunpack.c.l.bf16 %v555
  %v654 = vunpack.c.l.bf16 %v556
  %v655 = vunpack.c.l.bf16 %v557
  %v656 = vunpack.c.l.bf16 %v558
  %v657 = vunpack.c.l.bf16 %v559
  %v658 = vunpack.c.l.bf16 %v560
  %v659 = vunpack.c.l.bf16 %v561
  %v660 = vunpack.c.l.bf16 %v562
  %v661 = vunpack.c.l.bf16 %v563
  %v662 = vunpack.c.l.bf16 %v564
  %v663 = vunpack.c.l.bf16 %v565
  %v664 = vunpack.c.l.bf16 %v566
  %v665 = vunpack.c.l.bf16 %v567
  %v666 = vunpack.c.l.bf16 %v568
  %v667 = vunpack.c.l.bf16 %v569
  %v668 = vunpack.c.l.bf16 %v570
  %v669 = vunpack.c.l.bf16 %v571
  %v670 = vunpack.c.l.bf16 %v572
  %v671 = vunpack.c.l.bf16 %v573
  %v672 = vunpack.c.l.bf16 %v574
  %v673 = vunpack.c.l.bf16 %v575
  %v674 = vunpack.c.l.bf16 %v576
  %v675 = vunpack.c.l.bf16 %v577
  %v676 = vunpack.c.l.bf16 %v578
  %v677 = vunpack.c.l.bf16 %v579
  %v678 = vunpack.c.l.bf16 %v580
  %v679 = vunpack.c.l.bf16 %v581
  %v680 = vunpack.c.l.bf16 %v582
  %v681 = vunpack.c.l.bf16 %v583
  %v682 = vunpack.c.l.bf16 %v584
  %v683 = vunpack.c.l.bf16 %v585
  %v684 = vunpack.c.l.bf16 %v586
  %v685 = vunpack.c.l.bf16 %v587
  %v686 = vunpack.c.l.bf16 %v588
  %v687 = vunpack.c.l.bf16 %v589
  %v688 = vunpack.c.l.bf16 %v590
  %v689 = vunpack.c.l.bf16 %v591
  %v690 = vunpack.c.l.bf16 %v592
  %v691 = vunpack.c.l.bf16 %v593
  %v692 = vunpack.c.l.bf16 %v594
  %v693 = vunpack.c.l.bf16 %v595
  %v694 = vunpack.c.l.bf16 %v596
  %v695 = vunpack.c.l.bf16 %v597
  %v696 = vunpack.c.l.bf16 %v598
  %v697 = vmax.f32 %v599, %v648
  %v698 = vmax.f32 %v600, %v649
  %v699 = vmax.f32 %v601, %v650
  %v700 = vmax.f32 %v602, %v651
  %v701 = vmax.f32 %v603, %v652
  %v702 = vmax.f32 %v604, %v653
  %v703 = vmax.f32 %v605, %v654
  %v704 = vmax.f32 %v606, %v655
  %v705 = vmax.f32 %v607, %v656
  %v706 = vmax.f32 %v608, %v657
  %v707 = vmax.f32 %v609, %v658
  %v708 = vmax.f32 %v610, %v659
  %v709 = vmax.f32 %v611, %v660
  %v710 = vmax.f32 %v612, %v661
  %v711 = vmax.f32 %v613, %v662
  %v712 = vmax.f32 %v614, %v663
  %v713 = vmax.f32 %v615, %v664
  %v714 = vmax.f32 %v616, %v665
  %v715 = vmax.f32 %v617, %v666
  %v716 = vmax.f32 %v618, %v667
  %v717 = vmax.f32 %v619, %v668
  %v718 = vmax.f32 %v620, %v669
  %v719 = vmax.f32 %v621, %v670
  %v720 = vmax.f32 %v622, %v671
  %v721 = vmax.f32 %v623, %v672
  %v722 = vmax.f32 %v624, %v673
  %v723 = vmax.f32 %v625, %v674
  %v724 = vmax.f32 %v626, %v675
  %v725 = vmax.f32 %v627, %v676
  %v726 = vmax.f32 %v628, %v677
  %v727 = vmax.f32 %v629, %v678
  %v728 = vmax.f32 %v630, %v679
  %v729 = vmax.f32 %v631, %v680
  %v730 = vmax.f32 %v632, %v681
  %v731 = vmax.f32 %v633, %v682
  %v732 = vmax.f32 %v634, %v683
  %v733 = vmax.f32 %v635, %v684
  %v734 = vmax.f32 %v636, %v685
  %v735 = vmax.f32 %v637, %v686
  %v736 = vmax.f32 %v638, %v687
  %v737 = vmax.f32 %v639, %v688
  %v738 = vmax.f32 %v640, %v689
  %v739 = vmax.f32 %v641, %v690
  %v740 = vmax.f32 %v642, %v691
  %v741 = vmax.f32 %v643, %v692
  %v742 = vmax.f32 %v644, %v693
  %v743 = vmax.f32 %v645, %v694
  %v744 = vmax.f32 %v646, %v695
  %v745 = vmax.f32 %v647, %v696
  %v746 = vpack.c.bf16 %v697, %v697
  %v747 = vpack.c.bf16 %v698, %v698
  %v748 = vpack.c.bf16 %v699, %v699
  %v749 = vpack.c.bf16 %v700, %v700
  %v750 = vpack.c.bf16 %v701, %v701
  %v751 = vpack.c.bf16 %v702, %v702
  %v752 = vpack.c.bf16 %v703, %v703
  %v753 = vpack.c.bf16 %v704, %v704
  %v754 = vpack.c.bf16 %v705, %v705
  %v755 = vpack.c.bf16 %v706, %v706
  %v756 = vpack.c.bf16 %v707, %v707
  %v757 = vpack.c.bf16 %v708, %v708
  %v758 = vpack.c.bf16 %v709, %v709
  %v759 = vpack.c.bf16 %v710, %v710
  %v760 = vpack.c.bf16 %v711, %v711
  %v761 = vpack.c.bf16 %v712, %v712
  %v762 = vpack.c.bf16 %v713, %v713
  %v763 = vpack.c.bf16 %v714, %v714
  %v764 = vpack.c.bf16 %v715, %v715
  %v765 = vpack.c.bf16 %v716, %v716
  %v766 = vpack.c.bf16 %v717, %v717
  %v767 = vpack.c.bf16 %v718, %v718
  %v768 = vpack.c.bf16 %v719, %v719
  %v769 = vpack.c.bf16 %v720, %v720
  %v770 = vpack.c.bf16 %v721, %v721
  %v771 = vpack.c.bf16 %v722, %v722
  %v772 = vpack.c.bf16 %v723, %v723
  %v773 = vpack.c.bf16 %v724, %v724
  %v774 = vpack.c.bf16 %v725, %v725
  %v775 = vpack.c.bf16 %v726, %v726
  %v776 = vpack.c.bf16 %v727, %v727
  %v777 = vpack.c.bf16 %v728, %v728
  %v778 = vpack.c.bf16 %v729, %v729
  %v779 = vpack.c.bf16 %v730, %v730
  %v780 = vpack.c.bf16 %v731, %v731
  %v781 = vpack.c.bf16 %v732, %v732
  %v782 = vpack.c.bf16 %v733, %v733
  %v783 = vpack.c.bf16 %v734, %v734
  %v784 = vpack.c.bf16 %v735, %v735
  %v785 = vpack.c.bf16 %v736, %v736
  %v786 = vpack.c.bf16 %v737, %v737
  %v787 = vpack.c.bf16 %v738, %v738
  %v788 = vpack.c.bf16 %v739, %v739
  %v789 = vpack.c.bf16 %v740, %v740
  %v790 = vpack.c.bf16 %v741, %v741
  %v791 = vpack.c.bf16 %v742, %v742
  %v792 = vpack.c.bf16 %v743, %v743
  %v793 = vpack.c.bf16 %v744, %v744
  %v794 = vpack.c.bf16 %v745, %v745
  %795 = vst [vmem:[%s1] sm:$0xf] %v746
  %796 = vst [vmem:[%s1 + $0x4] sm:$0xf] %v747
  %797 = vst [vmem:[%s1 + $0x8] sm:$0xf] %v748
  %798 = vst [vmem:[%s1 + $0xc] sm:$0xf] %v749
  %799 = vst [vmem:[%s1 + $0x10] sm:$0xf] %v750
  %800 = vst [vmem:[%s1 + $0x14] sm:$0xf] %v751
  %801 = vst [vmem:[%s1 + $0x18] sm:$0xf] %v752
  %802 = vst [vmem:[%s1 + $0x1c] sm:$0xf] %v753
  %803 = vst [vmem:[%s1 + $0x20] sm:$0xf] %v754
  %804 = vst [vmem:[%s1 + $0x24] sm:$0xf] %v755
  %805 = vst [vmem:[%s1 + $0x28] sm:$0xf] %v756
  %806 = vst [vmem:[%s1 + $0x2c] sm:$0xf] %v757
  %807 = vst [vmem:[%s1 + $0x30] sm:$0xf] %v758
  %808 = vst [vmem:[%s1 + $0x34] sm:$0xf] %v759
  %809 = vst [vmem:[%s1 + $0x38] sm:$0xf] %v760
  %810 = vst [vmem:[%s1 + $0x3c] sm:$0xf] %v761
  %811 = vst [vmem:[%s1 + $0x40] sm:$0xf] %v762
  %812 = vst [vmem:[%s1 + $0x44] sm:$0xf] %v763
  %813 = vst [vmem:[%s1 + $0x48] sm:$0xf] %v764
  %814 = vst [vmem:[%s1 + $0x4c] sm:$0xf] %v765
  %815 = vst [vmem:[%s1 + $0x50] sm:$0xf] %v766
  %816 = vst [vmem:[%s1 + $0x54] sm:$0xf] %v767
  %817 = vst [vmem:[%s1 + $0x58] sm:$0xf] %v768
  %818 = vst [vmem:[%s1 + $0x5c] sm:$0xf] %v769
  %819 = vst [vmem:[%s1 + $0x60] sm:$0xf] %v770
  %820 = vst [vmem:[%s1 + $0x64] sm:$0xf] %v771
  %821 = vst [vmem:[%s1 + $0x68] sm:$0xf] %v772
  %822 = vst [vmem:[%s1 + $0x6c] sm:$0xf] %v773
  %823 = vst [vmem:[%s1 + $0x70] sm:$0xf] %v774
  %824 = vst [vmem:[%s1 + $0x74] sm:$0xf] %v775
  %825 = vst [vmem:[%s1 + $0x78] sm:$0xf] %v776
  %826 = vst [vmem:[%s1 + $0x7c] sm:$0xf] %v777
  %827 = vst [vmem:[%s1 + $0x80] sm:$0xf] %v778
  %828 = vst [vmem:[%s1 + $0x84] sm:$0xf] %v779
  %829 = vst [vmem:[%s1 + $0x88] sm:$0xf] %v780
  %830 = vst [vmem:[%s1 + $0x8c] sm:$0xf] %v781
  %831 = vst [vmem:[%s1 + $0x90] sm:$0xf] %v782
  %832 = vst [vmem:[%s1 + $0x94] sm:$0xf] %v783
  %833 = vst [vmem:[%s1 + $0x98] sm:$0xf] %v784
  %834 = vst [vmem:[%s1 + $0x9c] sm:$0xf] %v785
  %835 = vst [vmem:[%s1 + $0xa0] sm:$0xf] %v786
  %836 = vst [vmem:[%s1 + $0xa4] sm:$0xf] %v787
  %837 = vst [vmem:[%s1 + $0xa8] sm:$0xf] %v788
  %838 = vst [vmem:[%s1 + $0xac] sm:$0xf] %v789
  %839 = vst [vmem:[%s1 + $0xb0] sm:$0xf] %v790
  %840 = vst [vmem:[%s1 + $0xb4] sm:$0xf] %v791
  %841 = vst [vmem:[%s1 + $0xb8] sm:$0xf] %v792
  %842 = vst [vmem:[%s1 + $0xbc] sm:$0xf] %v793
  %843 = vst [vmem:[%s1 + $0xc0] sm:$0xf] %v794
  // Predicated region
  $region6: #{forward.5} parent=0 // pred_check
    _
  $region7: #{forward.5} parent=0 // pred_check_branch
    %845 = sbr.rel (0) target = $region9
  $region8: #{forward.5} parent=0 // pred_region
    _
  $region9: #{forward.5} parent=0 // pred_fallthru
    _
  // Predicated region
  $region10: #{forward.5} parent=0 // pred_check
    _
  $region11: #{forward.5} parent=0 // pred_check_branch
    %847 = sbr.rel (0) target = $region13
  $region12: #{forward.5} parent=0 // pred_region
    _
  $region13: #{forward.5} parent=0 // pred_fallthru
    _

// kernel: forward.6
$region0: #{forward.6}
  #allocation0 [shape = 'u32[]', space=smem, size = 0x4, offset = 0x4, fixed_abs, tag = 'smem constant byte address 0x4 - core index']
  #allocation1 [shape = 'u32[72,128]{1,0:T(1,128)}', space=vmem, size = 0x9000, scoped, tag = 'internal scratch']
  %s0 = inlined_call_operand.vmem [shape: bf16[208,3200], index: 0, kind: input, shape index: {}]
  %s1 = inlined_call_operand.vmem [shape: bf16[3200,128], index: 1, kind: input, shape index: {}]
  %s2 = inlined_call_operand.vmem [shape: f32[1,128], index: 2, kind: input, shape index: {}]
  %s3 = inlined_call_operand.vmem [shape: f32[1,128], index: 3, kind: input, shape index: {}]
  %s4 = inlined_call_operand.vmem [shape: f32[208,128], index: 4, kind: output, shape index: {}]
  %s5 = sld [smem:[#allocation0]]
  $region26: #{forward.6} parent=0
    _
  %s7 = ssub.s32 1, %s5
  %s8 = scalar_select 0, %s7, %s5
  // Predicated region
  $region2: #{forward.6} parent=0 // pred_check
    _
  $region3: #{forward.6} parent=0 // pred_check_branch
    %10 = sbr.rel (0) target = $region5
  $region4: #{forward.6} parent=0 // pred_region
    _
  $region5: #{forward.6} parent=0 // pred_fallthru
    _
  // Predicated region
  $region6: #{forward.6} parent=0 // pred_check
    _
  $region7: #{forward.6} parent=0 // pred_check_branch
    %12 = sbr.rel (0) target = $region9
  $region8: #{forward.6} parent=0 // pred_region
    _
  $region9: #{forward.6} parent=0 // pred_fallthru
    _
  // Predicated region
  $region10: #{forward.6} parent=0 // pred_check
    _
  $region11: #{forward.6} parent=0 // pred_check_branch
    %14 = sbr.rel (0) target = $region13
  $region12: #{forward.6} parent=0 // pred_region
    _
  $region13: #{forward.6} parent=0 // pred_fallthru
    _
  // Predicated region
  $region14: #{forward.6} parent=0 // pred_check
    _
  $region15: #{forward.6} parent=0 // pred_check_branch
    %16 = sbr.rel (0) target = $region17
  $region16: #{forward.6} parent=0 // pred_region
    _
  $region17: #{forward.6} parent=0 // pred_fallthru
    _
  %v17 = vld [vmem:[%s0] sm:$0xff]
  %v18 = vld [vmem:[%s0 + $0x8] sm:$0xff]
  %v19 = vld [vmem:[%s0 + $0x10] sm:$0xff]
  %v20 = vld [vmem:[%s0 + $0x18] sm:$0xff]
  %v21 = vld [vmem:[%s0 + $0x20] sm:$0xff]
  %v22 = vld [vmem:[%s0 + $0x28] sm:$0xff]
  %v23 = vld [vmem:[%s0 + $0x30] sm:$0xff]
  %v24 = vld [vmem:[%s0 + $0x38] sm:$0xff]
  %v25 = vld [vmem:[%s0 + $0x40] sm:$0xff]
  %v26 = vld [vmem:[%s0 + $0x48] sm:$0xff]
  %v27 = vld [vmem:[%s0 + $0x50] sm:$0xff]
  %v28 = vld [vmem:[%s0 + $0x58] sm:$0xff]
  %v29 = vld [vmem:[%s0 + $0x60] sm:$0xf]
  %v30 = vld [vmem:[%s0 + $0x64] sm:$0xff]
  %v31 = vld [vmem:[%s0 + $0x6c] sm:$0xff]
  %v32 = vld [vmem:[%s0 + $0x74] sm:$0xff]
  %v33 = vld [vmem:[%s0 + $0x7c] sm:$0xff]
  %v34 = vld [vmem:[%s0 + $0x84] sm:$0xff]
  %v35 = vld [vmem:[%s0 + $0x8c] sm:$0xff]
  %v36 = vld [vmem:[%s0 + $0x94] sm:$0xff]
  %v37 = vld [vmem:[%s0 + $0x9c] sm:$0xff]
  %v38 = vld [vmem:[%s0 + $0xa4] sm:$0xff]
  %v39 = vld [vmem:[%s0 + $0xac] sm:$0xff]
  %v40 = vld [vmem:[%s0 + $0xb4] sm:$0xff]
  %v41 = vld [vmem:[%s0 + $0xbc] sm:$0xff]
  %v42 = vld [vmem:[%s0 + $0xc4] sm:$0xf]
  %v43 = vld [vmem:[%s0 + $0xc8] sm:$0xff]
  %v44 = vld [vmem:[%s0 + $0xd0] sm:$0xff]
  %v45 = vld [vmem:[%s0 + $0xd8] sm:$0xff]
  %v46 = vld [vmem:[%s0 + $0xe0] sm:$0xff]
  %v47 = vld [vmem:[%s0 + $0xe8] sm:$0xff]
  %v48 = vld [vmem:[%s0 + $0xf0] sm:$0xff]
  %v49 = vld [vmem:[%s0 + $0xf8] sm:$0xff]
  %v50 = vld [vmem:[%s0 + $0x100] sm:$0xff]
  %v51 = vld [vmem:[%s0 + $0x108] sm:$0xff]
  %v52 = vld [vmem:[%s0 + $0x110] sm:$0xff]
  %v53 = vld [vmem:[%s0 + $0x118] sm:$0xff]
  %v54 = vld [vmem:[%s0 + $0x120] sm:$0xff]
  %v55 = vld [vmem:[%s0 + $0x128] sm:$0xf]
  %v56 = vld [vmem:[%s0 + $0x12c] sm:$0xff]
  %v57 = vld [vmem:[%s0 + $0x134] sm:$0xff]
  %v58 = vld [vmem:[%s0 + $0x13c] sm:$0xff]
  %v59 = vld [vmem:[%s0 + $0x144] sm:$0xff]
  %v60 = vld [vmem:[%s0 + $0x14c] sm:$0xff]
  %v61 = vld [vmem:[%s0 + $0x154] sm:$0xff]
  %v62 = vld [vmem:[%s0 + $0x15c] sm:$0xff]
  %v63 = vld [vmem:[%s0 + $0x164] sm:$0xff]
  %v64 = vld [vmem:[%s0 + $0x16c] sm:$0xff]
  %v65 = vld [vmem:[%s0 + $0x174] sm:$0xff]
  %v66 = vld [vmem:[%s0 + $0x17c] sm:$0xff]
  %v67 = vld [vmem:[%s0 + $0x184] sm:$0xff]
  %v68 = vld [vmem:[%s0 + $0x18c] sm:$0xf]
  %v69 = vld [vmem:[%s0 + $0x190] sm:$0xff]
  %v70 = vld [vmem:[%s0 + $0x198] sm:$0xff]
  %v71 = vld [vmem:[%s0 + $0x1a0] sm:$0xff]
  %v72 = vld [vmem:[%s0 + $0x1a8] sm:$0xff]
  %v73 = vld [vmem:[%s0 + $0x1b0] sm:$0xff]
  %v74 = vld [vmem:[%s0 + $0x1b8] sm:$0xff]
  %v75 = vld [vmem:[%s0 + $0x1c0] sm:$0xff]
  %v76 = vld [vmem:[%s0 + $0x1c8] sm:$0xff]
  %v77 = vld [vmem:[%s0 + $0x1d0] sm:$0xff]
  %v78 = vld [vmem:[%s0 + $0x1d8] sm:$0xff]
  %v79 = vld [vmem:[%s0 + $0x1e0] sm:$0xff]
  %v80 = vld [vmem:[%s0 + $0x1e8] sm:$0xff]
  %v81 = vld [vmem:[%s0 + $0x1f0] sm:$0xf]
  %v82 = vld [vmem:[%s0 + $0x1f4] sm:$0xff]
  %v83 = vld [vmem:[%s0 + $0x1fc] sm:$0xff]
  %v84 = vld [vmem:[%s0 + $0x204] sm:$0xff]
  %v85 = vld [vmem:[%s0 + $0x20c] sm:$0xff]
  %v86 = vld [vmem:[%s0 + $0x214] sm:$0xff]
  %v87 = vld [vmem:[%s0 + $0x21c] sm:$0xff]
  %v88 = vld [vmem:[%s0 + $0x224] sm:$0xff]
  %v89 = vld [vmem:[%s0 + $0x22c] sm:$0xff]
  %v90 = vld [vmem:[%s0 + $0x234] sm:$0xff]
  %v91 = vld [vmem:[%s0 + $0x23c] sm:$0xff]
  %v92 = vld [vmem:[%s0 + $0x244] sm:$0xff]
  %v93 = vld [vmem:[%s0 + $0x24c] sm:$0xff]
  %v94 = vld [vmem:[%s0 + $0x254] sm:$0xf]
  %v95 = vld [vmem:[%s0 + $0x258] sm:$0xff]
  %v96 = vld [vmem:[%s0 + $0x260] sm:$0xff]
  %v97 = vld [vmem:[%s0 + $0x268] sm:$0xff]
  %v98 = vld [vmem:[%s0 + $0x270] sm:$0xff]
  %v99 = vld [vmem:[%s0 + $0x278] sm:$0xff]
  %v100 = vld [vmem:[%s0 + $0x280] sm:$0xff]
  %v101 = vld [vmem:[%s0 + $0x288] sm:$0xff]
  %v102 = vld [vmem:[%s0 + $0x290] sm:$0xff]
  %v103 = vld [vmem:[%s0 + $0x298] sm:$0xff]
  %v104 = vld [vmem:[%s0 + $0x2a0] sm:$0xff]
  %v105 = vld [vmem:[%s0 + $0x2a8] sm:$0xff]
  %v106 = vld [vmem:[%s0 + $0x2b0] sm:$0xff]
  %v107 = vld [vmem:[%s0 + $0x2b8] sm:$0xf]
  %v108 = vld [vmem:[%s0 + $0x2bc] sm:$0xff]
  %v109 = vld [vmem:[%s0 + $0x2c4] sm:$0xff]
  %v110 = vld [vmem:[%s0 + $0x2cc] sm:$0xff]
  %v111 = vld [vmem:[%s0 + $0x2d4] sm:$0xff]
  %v112 = vld [vmem:[%s0 + $0x2dc] sm:$0xff]
  %v113 = vld [vmem:[%s0 + $0x2e4] sm:$0xff]
  %v114 = vld [vmem:[%s0 + $0x2ec] sm:$0xff]
  %v115 = vld [vmem:[%s0 + $0x2f4] sm:$0xff]
  %v116 = vld [vmem:[%s0 + $0x2fc] sm:$0xff]
  %v117 = vld [vmem:[%s0 + $0x304] sm:$0xff]
  %v118 = vld [vmem:[%s0 + $0x30c] sm:$0xff]
  %v119 = vld [vmem:[%s0 + $0x314] sm:$0xff]
  %v120 = vld [vmem:[%s0 + $0x31c] sm:$0xf]
  %v121 = vld [vmem:[%s0 + $0x320] sm:$0xff]
  %v122 = vld [vmem:[%s0 + $0x328] sm:$0xff]
  %v123 = vld [vmem:[%s0 + $0x330] sm:$0xff]
  %v124 = vld [vmem:[%s0 + $0x338] sm:$0xff]
  %v125 = vld [vmem:[%s0 + $0x340] sm:$0xff]
  %v126 = vld [vmem:[%s0 + $0x348] sm:$0xff]
  %v127 = vld [vmem:[%s0 + $0x350] sm:$0xff]
  %v128 = vld [vmem:[%s0 + $0x358] sm:$0xff]
  %v129 = vld [vmem:[%s0 + $0x360] sm:$0xff]
  %v130 = vld [vmem:[%s0 + $0x368] sm:$0xff]
  %v131 = vld [vmem:[%s0 + $0x370] sm:$0xff]
  %v132 = vld [vmem:[%s0 + $0x378] sm:$0xff]
  %v133 = vld [vmem:[%s0 + $0x380] sm:$0xf]
  %v134 = vld [vmem:[%s0 + $0x384] sm:$0xff]
  %v135 = vld [vmem:[%s0 + $0x38c] sm:$0xff]
  %v136 = vld [vmem:[%s0 + $0x394] sm:$0xff]
  %v137 = vld [vmem:[%s0 + $0x39c] sm:$0xff]
  %v138 = vld [vmem:[%s0 + $0x3a4] sm:$0xff]
  %v139 = vld [vmem:[%s0 + $0x3ac] sm:$0xff]
  %v140 = vld [vmem:[%s0 + $0x3b4] sm:$0xff]
  %v141 = vld [vmem:[%s0 + $0x3bc] sm:$0xff]
  %v142 = vld [vmem:[%s0 + $0x3c4] sm:$0xff]
  %v143 = vld [vmem:[%s0 + $0x3cc] sm:$0xff]
  %v144 = vld [vmem:[%s0 + $0x3d4] sm:$0xff]
  %v145 = vld [vmem:[%s0 + $0x3dc] sm:$0xff]
  %v146 = vld [vmem:[%s0 + $0x3e4] sm:$0xf]
  %v147 = vld [vmem:[%s0 + $0x3e8] sm:$0xff]
  %v148 = vld [vmem:[%s0 + $0x3f0] sm:$0xff]
  %v149 = vld [vmem:[%s0 + $0x3f8] sm:$0xff]
  %v150 = vld [vmem:[%s0 + $0x400] sm:$0xff]
  %v151 = vld [vmem:[%s0 + $0x408] sm:$0xff]
  %v152 = vld [vmem:[%s0 + $0x410] sm:$0xff]
  %v153 = vld [vmem:[%s0 + $0x418] sm:$0xff]
  %v154 = vld [vmem:[%s0 + $0x420] sm:$0xff]
  %v155 = vld [vmem:[%s0 + $0x428] sm:$0xff]
  %v156 = vld [vmem:[%s0 + $0x430] sm:$0xff]
  %v157 = vld [vmem:[%s0 + $0x438] sm:$0xff]
  %v158 = vld [vmem:[%s0 + $0x440] sm:$0xff]
  %v159 = vld [vmem:[%s0 + $0x448] sm:$0xf]
  %v160 = vld [vmem:[%s0 + $0x44c] sm:$0xff]
  %v161 = vld [vmem:[%s0 + $0x454] sm:$0xff]
  %v162 = vld [vmem:[%s0 + $0x45c] sm:$0xff]
  %v163 = vld [vmem:[%s0 + $0x464] sm:$0xff]
  %v164 = vld [vmem:[%s0 + $0x46c] sm:$0xff]
  %v165 = vld [vmem:[%s0 + $0x474] sm:$0xff]
  %v166 = vld [vmem:[%s0 + $0x47c] sm:$0xff]
  %v167 = vld [vmem:[%s0 + $0x484] sm:$0xff]
  %v168 = vld [vmem:[%s0 + $0x48c] sm:$0xff]
  %v169 = vld [vmem:[%s0 + $0x494] sm:$0xff]
  %v170 = vld [vmem:[%s0 + $0x49c] sm:$0xff]
  %v171 = vld [vmem:[%s0 + $0x4a4] sm:$0xff]
  %v172 = vld [vmem:[%s0 + $0x4ac] sm:$0xf]
  %v173 = vld [vmem:[%s0 + $0x4b0] sm:$0xff]
  %v174 = vld [vmem:[%s0 + $0x4b8] sm:$0xff]
  %v175 = vld [vmem:[%s0 + $0x4c0] sm:$0xff]
  %v176 = vld [vmem:[%s0 + $0x4c8] sm:$0xff]
  %v177 = vld [vmem:[%s0 + $0x4d0] sm:$0xff]
  %v178 = vld [vmem:[%s0 + $0x4d8] sm:$0xff]
  %v179 = vld [vmem:[%s0 + $0x4e0] sm:$0xff]
  %v180 = vld [vmem:[%s0 + $0x4e8] sm:$0xff]
  %v181 = vld [vmem:[%s0 + $0x4f0] sm:$0xff]
  %v182 = vld [vmem:[%s0 + $0x4f8] sm:$0xff]
  %v183 = vld [vmem:[%s0 + $0x500] sm:$0xff]
  %v184 = vld [vmem:[%s0 + $0x508] sm:$0xff]
  %v185 = vld [vmem:[%s0 + $0x510] sm:$0xf]
  %v186 = vld [vmem:[%s0 + $0x514] sm:$0xff]
  %v187 = vld [vmem:[%s0 + $0x51c] sm:$0xff]
  %v188 = vld [vmem:[%s0 + $0x524] sm:$0xff]
  %v189 = vld [vmem:[%s0 + $0x52c] sm:$0xff]
  %v190 = vld [vmem:[%s0 + $0x534] sm:$0xff]
  %v191 = vld [vmem:[%s0 + $0x53c] sm:$0xff]
  %v192 = vld [vmem:[%s0 + $0x544] sm:$0xff]
  %v193 = vld [vmem:[%s0 + $0x54c] sm:$0xff]
  %v194 = vld [vmem:[%s0 + $0x554] sm:$0xff]
  %v195 = vld [vmem:[%s0 + $0x55c] sm:$0xff]
  %v196 = vld [vmem:[%s0 + $0x564] sm:$0xff]
  %v197 = vld [vmem:[%s0 + $0x56c] sm:$0xff]
  %v198 = vld [vmem:[%s0 + $0x574] sm:$0xf]
  %v199 = vld [vmem:[%s0 + $0x578] sm:$0xff]
  %v200 = vld [vmem:[%s0 + $0x580] sm:$0xff]
  %v201 = vld [vmem:[%s0 + $0x588] sm:$0xff]
  %v202 = vld [vmem:[%s0 + $0x590] sm:$0xff]
  %v203 = vld [vmem:[%s0 + $0x598] sm:$0xff]
  %v204 = vld [vmem:[%s0 + $0x5a0] sm:$0xff]
  %v205 = vld [vmem:[%s0 + $0x5a8] sm:$0xff]
  %v206 = vld [vmem:[%s0 + $0x5b0] sm:$0xff]
  %v207 = vld [vmem:[%s0 + $0x5b8] sm:$0xff]
  %v208 = vld [vmem:[%s0 + $0x5c0] sm:$0xff]
  %v209 = vld [vmem:[%s0 + $0x5c8] sm:$0xff]
  %v210 = vld [vmem:[%s0 + $0x5d0] sm:$0xff]
  %v211 = vld [vmem:[%s0 + $0x5d8] sm:$0xf]
  %v212 = vld [vmem:[%s0 + $0x5dc] sm:$0xff]
  %v213 = vld [vmem:[%s0 + $0x5e4] sm:$0xff]
  %v214 = vld [vmem:[%s0 + $0x5ec] sm:$0xff]
  %v215 = vld [vmem:[%s0 + $0x5f4] sm:$0xff]
  %v216 = vld [vmem:[%s0 + $0x5fc] sm:$0xff]
  %v217 = vld [vmem:[%s0 + $0x604] sm:$0xff]
  %v218 = vld [vmem:[%s0 + $0x60c] sm:$0xff]
  %v219 = vld [vmem:[%s0 + $0x614] sm:$0xff]
  %v220 = vld [vmem:[%s0 + $0x61c] sm:$0xff]
  %v221 = vld [vmem:[%s0 + $0x624] sm:$0xff]
  %v222 = vld [vmem:[%s0 + $0x62c] sm:$0xff]
  %v223 = vld [vmem:[%s0 + $0x634] sm:$0xff]
  %v224 = vld [vmem:[%s0 + $0x63c] sm:$0xf]
  %v225 = vld [vmem:[%s0 + $0x640] sm:$0xff]
  %v226 = vld [vmem:[%s0 + $0x648] sm:$0xff]
  %v227 = vld [vmem:[%s0 + $0x650] sm:$0xff]
  %v228 = vld [vmem:[%s0 + $0x658] sm:$0xff]
  %v229 = vld [vmem:[%s0 + $0x660] sm:$0xff]
  %v230 = vld [vmem:[%s0 + $0x668] sm:$0xff]
  %v231 = vld [vmem:[%s0 + $0x670] sm:$0xff]
  %v232 = vld [vmem:[%s0 + $0x678] sm:$0xff]
  %v233 = vld [vmem:[%s0 + $0x680] sm:$0xff]
  %v234 = vld [vmem:[%s0 + $0x688] sm:$0xff]
  %v235 = vld [vmem:[%s0 + $0x690] sm:$0xff]
  %v236 = vld [vmem:[%s0 + $0x698] sm:$0xff]
  %v237 = vld [vmem:[%s0 + $0x6a0] sm:$0xf]
  %v238 = vld [vmem:[%s0 + $0x6a4] sm:$0xff]
  %v239 = vld [vmem:[%s0 + $0x6ac] sm:$0xff]
  %v240 = vld [vmem:[%s0 + $0x6b4] sm:$0xff]
  %v241 = vld [vmem:[%s0 + $0x6bc] sm:$0xff]
  %v242 = vld [vmem:[%s0 + $0x6c4] sm:$0xff]
  %v243 = vld [vmem:[%s0 + $0x6cc] sm:$0xff]
  %v244 = vld [vmem:[%s0 + $0x6d4] sm:$0xff]
  %v245 = vld [vmem:[%s0 + $0x6dc] sm:$0xff]
  %v246 = vld [vmem:[%s0 + $0x6e4] sm:$0xff]
  %v247 = vld [vmem:[%s0 + $0x6ec] sm:$0xff]
  %v248 = vld [vmem:[%s0 + $0x6f4] sm:$0xff]
  %v249 = vld [vmem:[%s0 + $0x6fc] sm:$0xff]
  %v250 = vld [vmem:[%s0 + $0x704] sm:$0xf]
  %v251 = vld [vmem:[%s0 + $0x708] sm:$0xff]
  %v252 = vld [vmem:[%s0 + $0x710] sm:$0xff]
  %v253 = vld [vmem:[%s0 + $0x718] sm:$0xff]
  %v254 = vld [vmem:[%s0 + $0x720] sm:$0xff]
  %v255 = vld [vmem:[%s0 + $0x728] sm:$0xff]
  %v256 = vld [vmem:[%s0 + $0x730] sm:$0xff]
  %v257 = vld [vmem:[%s0 + $0x738] sm:$0xff]
  %v258 = vld [vmem:[%s0 + $0x740] sm:$0xff]
  %v259 = vld [vmem:[%s0 + $0x748] sm:$0xff]
  %v260 = vld [vmem:[%s0 + $0x750] sm:$0xff]
  %v261 = vld [vmem:[%s0 + $0x758] sm:$0xff]
  %v262 = vld [vmem:[%s0 + $0x760] sm:$0xff]
  %v263 = vld [vmem:[%s0 + $0x768] sm:$0xf]
  %v264 = vld [vmem:[%s0 + $0x76c] sm:$0xff]
  %v265 = vld [vmem:[%s0 + $0x774] sm:$0xff]
  %v266 = vld [vmem:[%s0 + $0x77c] sm:$0xff]
  %v267 = vld [vmem:[%s0 + $0x784] sm:$0xff]
  %v268 = vld [vmem:[%s0 + $0x78c] sm:$0xff]
  %v269 = vld [vmem:[%s0 + $0x794] sm:$0xff]
  %v270 = vld [vmem:[%s0 + $0x79c] sm:$0xff]
  %v271 = vld [vmem:[%s0 + $0x7a4] sm:$0xff]
  %v272 = vld [vmem:[%s0 + $0x7ac] sm:$0xff]
  %v273 = vld [vmem:[%s0 + $0x7b4] sm:$0xff]
  %v274 = vld [vmem:[%s0 + $0x7bc] sm:$0xff]
  %v275 = vld [vmem:[%s0 + $0x7c4] sm:$0xff]
  %v276 = vld [vmem:[%s0 + $0x7cc] sm:$0xf]
  %v277 = vld [vmem:[%s0 + $0x7d0] sm:$0xff]
  %v278 = vld [vmem:[%s0 + $0x7d8] sm:$0xff]
  %v279 = vld [vmem:[%s0 + $0x7e0] sm:$0xff]
  %v280 = vld [vmem:[%s0 + $0x7e8] sm:$0xff]
  %v281 = vld [vmem:[%s0 + $0x7f0] sm:$0xff]
  %v282 = vld [vmem:[%s0 + $0x7f8] sm:$0xff]
  %v283 = vld [vmem:[%s0 + $0x800] sm:$0xff]
  %v284 = vld [vmem:[%s0 + $0x808] sm:$0xff]
  %v285 = vld [vmem:[%s0 + $0x810] sm:$0xff]
  %v286 = vld [vmem:[%s0 + $0x818] sm:$0xff]
  %v287 = vld [vmem:[%s0 + $0x820] sm:$0xff]
  %v288 = vld [vmem:[%s0 + $0x828] sm:$0xff]
  %v289 = vld [vmem:[%s0 + $0x830] sm:$0xf]
  %v290 = vld [vmem:[%s0 + $0x834] sm:$0xff]
  %v291 = vld [vmem:[%s0 + $0x83c] sm:$0xff]
  %v292 = vld [vmem:[%s0 + $0x844] sm:$0xff]
  %v293 = vld [vmem:[%s0 + $0x84c] sm:$0xff]
  %v294 = vld [vmem:[%s0 + $0x854] sm:$0xff]
  %v295 = vld [vmem:[%s0 + $0x85c] sm:$0xff]
  %v296 = vld [vmem:[%s0 + $0x864] sm:$0xff]
  %v297 = vld [vmem:[%s0 + $0x86c] sm:$0xff]
  %v298 = vld [vmem:[%s0 + $0x874] sm:$0xff]
  %v299 = vld [vmem:[%s0 + $0x87c] sm:$0xff]
  %v300 = vld [vmem:[%s0 + $0x884] sm:$0xff]
  %v301 = vld [vmem:[%s0 + $0x88c] sm:$0xff]
  %v302 = vld [vmem:[%s0 + $0x894] sm:$0xf]
  %v303 = vld [vmem:[%s0 + $0x898] sm:$0xff]
  %v304 = vld [vmem:[%s0 + $0x8a0] sm:$0xff]
  %v305 = vld [vmem:[%s0 + $0x8a8] sm:$0xff]
  %v306 = vld [vmem:[%s0 + $0x8b0] sm:$0xff]
  %v307 = vld [vmem:[%s0 + $0x8b8] sm:$0xff]
  %v308 = vld [vmem:[%s0 + $0x8c0] sm:$0xff]
  %v309 = vld [vmem:[%s0 + $0x8c8] sm:$0xff]
  %v310 = vld [vmem:[%s0 + $0x8d0] sm:$0xff]
  %v311 = vld [vmem:[%s0 + $0x8d8] sm:$0xff]
  %v312 = vld [vmem:[%s0 + $0x8e0] sm:$0xff]
  %v313 = vld [vmem:[%s0 + $0x8e8] sm:$0xff]
  %v314 = vld [vmem:[%s0 + $0x8f0] sm:$0xff]
  %v315 = vld [vmem:[%s0 + $0x8f8] sm:$0xf]
  %v316 = vld [vmem:[%s0 + $0x8fc] sm:$0xff]
  %v317 = vld [vmem:[%s0 + $0x904] sm:$0xff]
  %v318 = vld [vmem:[%s0 + $0x90c] sm:$0xff]
  %v319 = vld [vmem:[%s0 + $0x914] sm:$0xff]
  %v320 = vld [vmem:[%s0 + $0x91c] sm:$0xff]
  %v321 = vld [vmem:[%s0 + $0x924] sm:$0xff]
  %v322 = vld [vmem:[%s0 + $0x92c] sm:$0xff]
  %v323 = vld [vmem:[%s0 + $0x934] sm:$0xff]
  %v324 = vld [vmem:[%s0 + $0x93c] sm:$0xff]
  %v325 = vld [vmem:[%s0 + $0x944] sm:$0xff]
  %v326 = vld [vmem:[%s0 + $0x94c] sm:$0xff]
  %v327 = vld [vmem:[%s0 + $0x954] sm:$0xff]
  %v328 = vld [vmem:[%s0 + $0x95c] sm:$0xf]
  %v329 = vld [vmem:[%s0 + $0x960] sm:$0xff]
  %v330 = vld [vmem:[%s0 + $0x968] sm:$0xff]
  %v331 = vld [vmem:[%s0 + $0x970] sm:$0xff]
  %v332 = vld [vmem:[%s0 + $0x978] sm:$0xff]
  %v333 = vld [vmem:[%s0 + $0x980] sm:$0xff]
  %v334 = vld [vmem:[%s0 + $0x988] sm:$0xff]
  %v335 = vld [vmem:[%s0 + $0x990] sm:$0xff]
  %v336 = vld [vmem:[%s0 + $0x998] sm:$0xff]
  %v337 = vld [vmem:[%s0 + $0x9a0] sm:$0xff]
  %v338 = vld [vmem:[%s0 + $0x9a8] sm:$0xff]
  %v339 = vld [vmem:[%s0 + $0x9b0] sm:$0xff]
  %v340 = vld [vmem:[%s0 + $0x9b8] sm:$0xff]
  %v341 = vld [vmem:[%s0 + $0x9c0] sm:$0xf]
  %v342 = vld [vmem:[%s0 + $0x9c4] sm:$0xff]
  %v343 = vld [vmem:[%s0 + $0x9cc] sm:$0xff]
  %v344 = vld [vmem:[%s0 + $0x9d4] sm:$0xff]
  %v345 = vld [vmem:[%s0 + $0x9dc] sm:$0xff]
  %v346 = vld [vmem:[%s0 + $0x9e4] sm:$0xff]
  %v347 = vld [vmem:[%s0 + $0x9ec] sm:$0xff]
  %v348 = vld [vmem:[%s0 + $0x9f4] sm:$0xff]
  %v349 = vld [vmem:[%s0 + $0x9fc] sm:$0xff]
  %v350 = vld [vmem:[%s0 + $0xa04] sm:$0xff]
  %v351 = vld [vmem:[%s0 + $0xa0c] sm:$0xff]
  %v352 = vld [vmem:[%s0 + $0xa14] sm:$0xff]
  %v353 = vld [vmem:[%s0 + $0xa1c] sm:$0xff]
  %v354 = vld [vmem:[%s0 + $0xa24] sm:$0xf]
  %v355 = vld [vmem:[%s1] sm:$0xf]
  %v356 = vld [vmem:[%s1 + $0x4] sm:$0xf]
  %v357 = vld [vmem:[%s1 + $0x8] sm:$0xf]
  %v358 = vld [vmem:[%s1 + $0xc] sm:$0xf]
  %v359 = vld [vmem:[%s1 + $0x10] sm:$0xf]
  %v360 = vld [vmem:[%s1 + $0x14] sm:$0xf]
  %v361 = vld [vmem:[%s1 + $0x18] sm:$0xf]
  %v362 = vld [vmem:[%s1 + $0x1c] sm:$0xf]
  %v363 = vld [vmem:[%s1 + $0x20] sm:$0xf]
  %v364 = vld [vmem:[%s1 + $0x24] sm:$0xf]
  %v365 = vld [vmem:[%s1 + $0x28] sm:$0xf]
  %v366 = vld [vmem:[%s1 + $0x2c] sm:$0xf]
  %v367 = vld [vmem:[%s1 + $0x30] sm:$0xf]
  %v368 = vld [vmem:[%s1 + $0x34] sm:$0xf]
  %v369 = vld [vmem:[%s1 + $0x38] sm:$0xf]
  %v370 = vld [vmem:[%s1 + $0x3c] sm:$0xf]
  %v371 = vld [vmem:[%s1 + $0x40] sm:$0xf]
  %v372 = vld [vmem:[%s1 + $0x44] sm:$0xf]
  %v373 = vld [vmem:[%s1 + $0x48] sm:$0xf]
  %v374 = vld [vmem:[%s1 + $0x4c] sm:$0xf]
  %v375 = vld [vmem:[%s1 + $0x50] sm:$0xf]
  %v376 = vld [vmem:[%s1 + $0x54] sm:$0xf]
  %v377 = vld [vmem:[%s1 + $0x58] sm:$0xf]
  %v378 = vld [vmem:[%s1 + $0x5c] sm:$0xf]
  %v379 = vld [vmem:[%s1 + $0x60] sm:$0xf]
  %v380 = vld [vmem:[%s1 + $0x64] sm:$0xf]
  %v381 = vld [vmem:[%s1 + $0x68] sm:$0xf]
  %v382 = vld [vmem:[%s1 + $0x6c] sm:$0xf]
  %v383 = vld [vmem:[%s1 + $0x70] sm:$0xf]
  %v384 = vld [vmem:[%s1 + $0x74] sm:$0xf]
  %v385 = vld [vmem:[%s1 + $0x78] sm:$0xf]
  %v386 = vld [vmem:[%s1 + $0x7c] sm:$0xf]
  %v387 = vld [vmem:[%s1 + $0x80] sm:$0xf]
  %v388 = vld [vmem:[%s1 + $0x84] sm:$0xf]
  %v389 = vld [vmem:[%s1 + $0x88] sm:$0xf]
  %v390 = vld [vmem:[%s1 + $0x8c] sm:$0xf]
  %v391 = vld [vmem:[%s1 + $0x90] sm:$0xf]
  %v392 = vld [vmem:[%s1 + $0x94] sm:$0xf]
  %v393 = vld [vmem:[%s1 + $0x98] sm:$0xf]
  %v394 = vld [vmem:[%s1 + $0x9c] sm:$0xf]
  %v395 = vld [vmem:[%s1 + $0xa0] sm:$0xf]
  %v396 = vld [vmem:[%s1 + $0xa4] sm:$0xf]
  %v397 = vld [vmem:[%s1 + $0xa8] sm:$0xf]
  %v398 = vld [vmem:[%s1 + $0xac] sm:$0xf]
  %v399 = vld [vmem:[%s1 + $0xb0] sm:$0xf]
  %v400 = vld [vmem:[%s1 + $0xb4] sm:$0xf]
  %v401 = vld [vmem:[%s1 + $0xb8] sm:$0xf]
  %v402 = vld [vmem:[%s1 + $0xbc] sm:$0xf]
  %v403 = vld [vmem:[%s1 + $0xc0] sm:$0xf]
  %v404 = vld [vmem:[%s1 + $0xc4] sm:$0xf]
  %v405 = vld [vmem:[%s1 + $0xc8] sm:$0xf]
  %v406 = vld [vmem:[%s1 + $0xcc] sm:$0xf]
  %v407 = vld [vmem:[%s1 + $0xd0] sm:$0xf]
  %v408 = vld [vmem:[%s1 + $0xd4] sm:$0xf]
  %v409 = vld [vmem:[%s1 + $0xd8] sm:$0xf]
  %v410 = vld [vmem:[%s1 + $0xdc] sm:$0xf]
  %v411 = vld [vmem:[%s1 + $0xe0] sm:$0xf]
  %v412 = vld [vmem:[%s1 + $0xe4] sm:$0xf]
  %v413 = vld [vmem:[%s1 + $0xe8] sm:$0xf]
  %v414 = vld [vmem:[%s1 + $0xec] sm:$0xf]
  %v415 = vld [vmem:[%s1 + $0xf0] sm:$0xf]
  %v416 = vld [vmem:[%s1 + $0xf4] sm:$0xf]
  %v417 = vld [vmem:[%s1 + $0xf8] sm:$0xf]
  %v418 = vld [vmem:[%s1 + $0xfc] sm:$0xf]
  %v419 = vld [vmem:[%s1 + $0x100] sm:$0xf]
  %v420 = vld [vmem:[%s1 + $0x104] sm:$0xf]
  %v421 = vld [vmem:[%s1 + $0x108] sm:$0xf]
  %v422 = vld [vmem:[%s1 + $0x10c] sm:$0xf]
  %v423 = vld [vmem:[%s1 + $0x110] sm:$0xf]
  %v424 = vld [vmem:[%s1 + $0x114] sm:$0xf]
  %v425 = vld [vmem:[%s1 + $0x118] sm:$0xf]
  %v426 = vld [vmem:[%s1 + $0x11c] sm:$0xf]
  %v427 = vld [vmem:[%s1 + $0x120] sm:$0xf]
  %v428 = vld [vmem:[%s1 + $0x124] sm:$0xf]
  %v429 = vld [vmem:[%s1 + $0x128] sm:$0xf]
  %v430 = vld [vmem:[%s1 + $0x12c] sm:$0xf]
  %v431 = vld [vmem:[%s1 + $0x130] sm:$0xf]
  %v432 = vld [vmem:[%s1 + $0x134] sm:$0xf]
  %v433 = vld [vmem:[%s1 + $0x138] sm:$0xf]
  %v434 = vld [vmem:[%s1 + $0x13c] sm:$0xf]
  %v435 = vld [vmem:[%s1 + $0x140] sm:$0xf]
  %v436 = vld [vmem:[%s1 + $0x144] sm:$0xf]
  %v437 = vld [vmem:[%s1 + $0x148] sm:$0xf]
  %v438 = vld [vmem:[%s1 + $0x14c] sm:$0xf]
  %v439 = vld [vmem:[%s1 + $0x150] sm:$0xf]
  %v440 = vld [vmem:[%s1 + $0x154] sm:$0xf]
  %v441 = vld [vmem:[%s1 + $0x158] sm:$0xf]
  %v442 = vld [vmem:[%s1 + $0x15c] sm:$0xf]
  %v443 = vld [vmem:[%s1 + $0x160] sm:$0xf]
  %v444 = vld [vmem:[%s1 + $0x164] sm:$0xf]
  %v445 = vld [vmem:[%s1 + $0x168] sm:$0xf]
  %v446 = vld [vmem:[%s1 + $0x16c] sm:$0xf]
  %v447 = vld [vmem:[%s1 + $0x170] sm:$0xf]
  %v448 = vld [vmem:[%s1 + $0x174] sm:$0xf]
  %v449 = vld [vmem:[%s1 + $0x178] sm:$0xf]
  %v450 = vld [vmem:[%s1 + $0x17c] sm:$0xf]
  %v451 = vld [vmem:[%s1 + $0x180] sm:$0xf]
  %v452 = vld [vmem:[%s1 + $0x184] sm:$0xf]
  %v453 = vld [vmem:[%s1 + $0x188] sm:$0xf]
  %v454 = vld [vmem:[%s1 + $0x18c] sm:$0xf]
  %v455 = vld [vmem:[%s1 + $0x190] sm:$0xf]
  %v456 = vld [vmem:[%s1 + $0x194] sm:$0xf]
  %v457 = vld [vmem:[%s1 + $0x198] sm:$0xf]
  %v458 = vld [vmem:[%s1 + $0x19c] sm:$0xf]
  %v459 = vld [vmem:[%s1 + $0x1a0] sm:$0xf]
  %v460 = vld [vmem:[%s1 + $0x1a4] sm:$0xf]
  %v461 = vld [vmem:[%s1 + $0x1a8] sm:$0xf]
  %v462 = vld [vmem:[%s1 + $0x1ac] sm:$0xf]
  %v463 = vld [vmem:[%s1 + $0x1b0] sm:$0xf]
  %v464 = vld [vmem:[%s1 + $0x1b4] sm:$0xf]
  %v465 = vld [vmem:[%s1 + $0x1b8] sm:$0xf]
  %v466 = vld [vmem:[%s1 + $0x1bc] sm:$0xf]
  %v467 = vld [vmem:[%s1 + $0x1c0] sm:$0xf]
  %v468 = vld [vmem:[%s1 + $0x1c4] sm:$0xf]
  %v469 = vld [vmem:[%s1 + $0x1c8] sm:$0xf]
  %v470 = vld [vmem:[%s1 + $0x1cc] sm:$0xf]
  %v471 = vld [vmem:[%s1 + $0x1d0] sm:$0xf]
  %v472 = vld [vmem:[%s1 + $0x1d4] sm:$0xf]
  %v473 = vld [vmem:[%s1 + $0x1d8] sm:$0xf]
  %v474 = vld [vmem:[%s1 + $0x1dc] sm:$0xf]
  %v475 = vld [vmem:[%s1 + $0x1e0] sm:$0xf]
  %v476 = vld [vmem:[%s1 + $0x1e4] sm:$0xf]
  %v477 = vld [vmem:[%s1 + $0x1e8] sm:$0xf]
  %v478 = vld [vmem:[%s1 + $0x1ec] sm:$0xf]
  %v479 = vld [vmem:[%s1 + $0x1f0] sm:$0xf]
  %v480 = vld [vmem:[%s1 + $0x1f4] sm:$0xf]
  %v481 = vld [vmem:[%s1 + $0x1f8] sm:$0xf]
  %v482 = vld [vmem:[%s1 + $0x1fc] sm:$0xf]
  %v483 = vld [vmem:[%s1 + $0x200] sm:$0xf]
  %v484 = vld [vmem:[%s1 + $0x204] sm:$0xf]
  %v485 = vld [vmem:[%s1 + $0x208] sm:$0xf]
  %v486 = vld [vmem:[%s1 + $0x20c] sm:$0xf]
  %v487 = vld [vmem:[%s1 + $0x210] sm:$0xf]
  %v488 = vld [vmem:[%s1 + $0x214] sm:$0xf]
  %v489 = vld [vmem:[%s1 + $0x218] sm:$0xf]
  %v490 = vld [vmem:[%s1 + $0x21c] sm:$0xf]
  %v491 = vld [vmem:[%s1 + $0x220] sm:$0xf]
  %v492 = vld [vmem:[%s1 + $0x224] sm:$0xf]
  %v493 = vld [vmem:[%s1 + $0x228] sm:$0xf]
  %v494 = vld [vmem:[%s1 + $0x22c] sm:$0xf]
  %v495 = vld [vmem:[%s1 + $0x230] sm:$0xf]
  %v496 = vld [vmem:[%s1 + $0x234] sm:$0xf]
  %v497 = vld [vmem:[%s1 + $0x238] sm:$0xf]
  %v498 = vld [vmem:[%s1 + $0x23c] sm:$0xf]
  %v499 = vld [vmem:[%s1 + $0x240] sm:$0xf]
  %v500 = vld [vmem:[%s1 + $0x244] sm:$0xf]
  %v501 = vld [vmem:[%s1 + $0x248] sm:$0xf]
  %v502 = vld [vmem:[%s1 + $0x24c] sm:$0xf]
  %v503 = vld [vmem:[%s1 + $0x250] sm:$0xf]
  %v504 = vld [vmem:[%s1 + $0x254] sm:$0xf]
  %v505 = vld [vmem:[%s1 + $0x258] sm:$0xf]
  %v506 = vld [vmem:[%s1 + $0x25c] sm:$0xf]
  %v507 = vld [vmem:[%s1 + $0x260] sm:$0xf]
  %v508 = vld [vmem:[%s1 + $0x264] sm:$0xf]
  %v509 = vld [vmem:[%s1 + $0x268] sm:$0xf]
  %v510 = vld [vmem:[%s1 + $0x26c] sm:$0xf]
  %v511 = vld [vmem:[%s1 + $0x270] sm:$0xf]
  %v512 = vld [vmem:[%s1 + $0x274] sm:$0xf]
  %v513 = vld [vmem:[%s1 + $0x278] sm:$0xf]
  %v514 = vld [vmem:[%s1 + $0x27c] sm:$0xf]
  %v515 = vld [vmem:[%s1 + $0x280] sm:$0xf]
  %v516 = vld [vmem:[%s1 + $0x284] sm:$0xf]
  %v517 = vld [vmem:[%s1 + $0x288] sm:$0xf]
  %v518 = vld [vmem:[%s1 + $0x28c] sm:$0xf]
  %v519 = vld [vmem:[%s1 + $0x290] sm:$0xf]
  %v520 = vld [vmem:[%s1 + $0x294] sm:$0xf]
  %v521 = vld [vmem:[%s1 + $0x298] sm:$0xf]
  %v522 = vld [vmem:[%s1 + $0x29c] sm:$0xf]
  %v523 = vld [vmem:[%s1 + $0x2a0] sm:$0xf]
  %v524 = vld [vmem:[%s1 + $0x2a4] sm:$0xf]
  %v525 = vld [vmem:[%s1 + $0x2a8] sm:$0xf]
  %v526 = vld [vmem:[%s1 + $0x2ac] sm:$0xf]
  %v527 = vld [vmem:[%s1 + $0x2b0] sm:$0xf]
  %v528 = vld [vmem:[%s1 + $0x2b4] sm:$0xf]
  %v529 = vld [vmem:[%s1 + $0x2b8] sm:$0xf]
  %v530 = vld [vmem:[%s1 + $0x2bc] sm:$0xf]
  %v531 = vld [vmem:[%s1 + $0x2c0] sm:$0xf]
  %v532 = vld [vmem:[%s1 + $0x2c4] sm:$0xf]
  %v533 = vld [vmem:[%s1 + $0x2c8] sm:$0xf]
  %v534 = vld [vmem:[%s1 + $0x2cc] sm:$0xf]
  %v535 = vld [vmem:[%s1 + $0x2d0] sm:$0xf]
  %v536 = vld [vmem:[%s1 + $0x2d4] sm:$0xf]
  %v537 = vld [vmem:[%s1 + $0x2d8] sm:$0xf]
  %v538 = vld [vmem:[%s1 + $0x2dc] sm:$0xf]
  %v539 = vld [vmem:[%s1 + $0x2e0] sm:$0xf]
  %v540 = vld [vmem:[%s1 + $0x2e4] sm:$0xf]
  %v541 = vld [vmem:[%s1 + $0x2e8] sm:$0xf]
  %v542 = vld [vmem:[%s1 + $0x2ec] sm:$0xf]
  %v543 = vld [vmem:[%s1 + $0x2f0] sm:$0xf]
  %v544 = vld [vmem:[%s1 + $0x2f4] sm:$0xf]
  %v545 = vld [vmem:[%s1 + $0x2f8] sm:$0xf]
  %v546 = vld [vmem:[%s1 + $0x2fc] sm:$0xf]
  %v547 = vld [vmem:[%s1 + $0x300] sm:$0xf]
  %v548 = vld [vmem:[%s1 + $0x304] sm:$0xf]
  %v549 = vld [vmem:[%s1 + $0x308] sm:$0xf]
  %v550 = vld [vmem:[%s1 + $0x30c] sm:$0xf]
  %v551 = vld [vmem:[%s1 + $0x310] sm:$0xf]
  %v552 = vld [vmem:[%s1 + $0x314] sm:$0xf]
  %v553 = vld [vmem:[%s1 + $0x318] sm:$0xf]
  %v554 = vld [vmem:[%s1 + $0x31c] sm:$0xf]
  %v555 = vld [vmem:[%s1 + $0x320] sm:$0xf]
  %v556 = vld [vmem:[%s1 + $0x324] sm:$0xf]
  %v557 = vld [vmem:[%s1 + $0x328] sm:$0xf]
  %v558 = vld [vmem:[%s1 + $0x32c] sm:$0xf]
  %v559 = vld [vmem:[%s1 + $0x330] sm:$0xf]
  %v560 = vld [vmem:[%s1 + $0x334] sm:$0xf]
  %v561 = vld [vmem:[%s1 + $0x338] sm:$0xf]
  %v562 = vld [vmem:[%s1 + $0x33c] sm:$0xf]
  %v563 = vld [vmem:[%s1 + $0x340] sm:$0xf]
  %v564 = vld [vmem:[%s1 + $0x344] sm:$0xf]
  %v565 = vld [vmem:[%s1 + $0x348] sm:$0xf]
  %v566 = vld [vmem:[%s1 + $0x34c] sm:$0xf]
  %v567 = vld [vmem:[%s1 + $0x350] sm:$0xf]
  %v568 = vld [vmem:[%s1 + $0x354] sm:$0xf]
  %v569 = vld [vmem:[%s1 + $0x358] sm:$0xf]
  %v570 = vld [vmem:[%s1 + $0x35c] sm:$0xf]
  %v571 = vld [vmem:[%s1 + $0x360] sm:$0xf]
  %v572 = vld [vmem:[%s1 + $0x364] sm:$0xf]
  %v573 = vld [vmem:[%s1 + $0x368] sm:$0xf]
  %v574 = vld [vmem:[%s1 + $0x36c] sm:$0xf]
  %v575 = vld [vmem:[%s1 + $0x370] sm:$0xf]
  %v576 = vld [vmem:[%s1 + $0x374] sm:$0xf]
  %v577 = vld [vmem:[%s1 + $0x378] sm:$0xf]
  %v578 = vld [vmem:[%s1 + $0x37c] sm:$0xf]
  %v579 = vld [vmem:[%s1 + $0x380] sm:$0xf]
  %v580 = vld [vmem:[%s1 + $0x384] sm:$0xf]
  %v581 = vld [vmem:[%s1 + $0x388] sm:$0xf]
  %v582 = vld [vmem:[%s1 + $0x38c] sm:$0xf]
  %v583 = vld [vmem:[%s1 + $0x390] sm:$0xf]
  %v584 = vld [vmem:[%s1 + $0x394] sm:$0xf]
  %v585 = vld [vmem:[%s1 + $0x398] sm:$0xf]
  %v586 = vld [vmem:[%s1 + $0x39c] sm:$0xf]
  %v587 = vld [vmem:[%s1 + $0x3a0] sm:$0xf]
  %v588 = vld [vmem:[%s1 + $0x3a4] sm:$0xf]
  %v589 = vld [vmem:[%s1 + $0x3a8] sm:$0xf]
  %v590 = vld [vmem:[%s1 + $0x3ac] sm:$0xf]
  %v591 = vld [vmem:[%s1 + $0x3b0] sm:$0xf]
  %v592 = vld [vmem:[%s1 + $0x3b4] sm:$0xf]
  %v593 = vld [vmem:[%s1 + $0x3b8] sm:$0xf]
  %v594 = vld [vmem:[%s1 + $0x3bc] sm:$0xf]
  %v595 = vld [vmem:[%s1 + $0x3c0] sm:$0xf]
  %v596 = vld [vmem:[%s1 + $0x3c4] sm:$0xf]
  %v597 = vld [vmem:[%s1 + $0x3c8] sm:$0xf]
  %v598 = vld [vmem:[%s1 + $0x3cc] sm:$0xf]
  %v599 = vld [vmem:[%s1 + $0x3d0] sm:$0xf]
  %v600 = vld [vmem:[%s1 + $0x3d4] sm:$0xf]
  %v601 = vld [vmem:[%s1 + $0x3d8] sm:$0xf]
  %v602 = vld [vmem:[%s1 + $0x3dc] sm:$0xf]
  %v603 = vld [vmem:[%s1 + $0x3e0] sm:$0xf]
  %v604 = vld [vmem:[%s1 + $0x3e4] sm:$0xf]
  %v605 = vld [vmem:[%s1 + $0x3e8] sm:$0xf]
  %v606 = vld [vmem:[%s1 + $0x3ec] sm:$0xf]
  %v607 = vld [vmem:[%s1 + $0x3f0] sm:$0xf]
  %v608 = vld [vmem:[%s1 + $0x3f4] sm:$0xf]
  %v609 = vld [vmem:[%s1 + $0x3f8] sm:$0xf]
  %v610 = vld [vmem:[%s1 + $0x3fc] sm:$0xf]
  %v611 = vld [vmem:[%s1 + $0x400] sm:$0xf]
  %v612 = vld [vmem:[%s1 + $0x404] sm:$0xf]
  %v613 = vld [vmem:[%s1 + $0x408] sm:$0xf]
  %v614 = vld [vmem:[%s1 + $0x40c] sm:$0xf]
  %v615 = vld [vmem:[%s1 + $0x410] sm:$0xf]
  %v616 = vld [vmem:[%s1 + $0x414] sm:$0xf]
  %v617 = vld [vmem:[%s1 + $0x418] sm:$0xf]
  %v618 = vld [vmem:[%s1 + $0x41c] sm:$0xf]
  %v619 = vld [vmem:[%s1 + $0x420] sm:$0xf]
  %v620 = vld [vmem:[%s1 + $0x424] sm:$0xf]
  %v621 = vld [vmem:[%s1 + $0x428] sm:$0xf]
  %v622 = vld [vmem:[%s1 + $0x42c] sm:$0xf]
  %v623 = vld [vmem:[%s1 + $0x430] sm:$0xf]
  %v624 = vld [vmem:[%s1 + $0x434] sm:$0xf]
  %v625 = vld [vmem:[%s1 + $0x438] sm:$0xf]
  %v626 = vld [vmem:[%s1 + $0x43c] sm:$0xf]
  %v627 = vld [vmem:[%s1 + $0x440] sm:$0xf]
  %v628 = vld [vmem:[%s1 + $0x444] sm:$0xf]
  %v629 = vld [vmem:[%s1 + $0x448] sm:$0xf]
  %v630 = vld [vmem:[%s1 + $0x44c] sm:$0xf]
  %v631 = vld [vmem:[%s1 + $0x450] sm:$0xf]
  %v632 = vld [vmem:[%s1 + $0x454] sm:$0xf]
  %v633 = vld [vmem:[%s1 + $0x458] sm:$0xf]
  %v634 = vld [vmem:[%s1 + $0x45c] sm:$0xf]
  %v635 = vld [vmem:[%s1 + $0x460] sm:$0xf]
  %v636 = vld [vmem:[%s1 + $0x464] sm:$0xf]
  %v637 = vld [vmem:[%s1 + $0x468] sm:$0xf]
  %v638 = vld [vmem:[%s1 + $0x46c] sm:$0xf]
  %v639 = vld [vmem:[%s1 + $0x470] sm:$0xf]
  %v640 = vld [vmem:[%s1 + $0x474] sm:$0xf]
  %v641 = vld [vmem:[%s1 + $0x478] sm:$0xf]
  %v642 = vld [vmem:[%s1 + $0x47c] sm:$0xf]
  %v643 = vld [vmem:[%s1 + $0x480] sm:$0xf]
  %v644 = vld [vmem:[%s1 + $0x484] sm:$0xf]
  %v645 = vld [vmem:[%s1 + $0x488] sm:$0xf]
  %v646 = vld [vmem:[%s1 + $0x48c] sm:$0xf]
  %v647 = vld [vmem:[%s1 + $0x490] sm:$0xf]
  %v648 = vld [vmem:[%s1 + $0x494] sm:$0xf]
  %v649 = vld [vmem:[%s1 + $0x498] sm:$0xf]
  %v650 = vld [vmem:[%s1 + $0x49c] sm:$0xf]
  %v651 = vld [vmem:[%s1 + $0x4a0] sm:$0xf]
  %v652 = vld [vmem:[%s1 + $0x4a4] sm:$0xf]
  %v653 = vld [vmem:[%s1 + $0x4a8] sm:$0xf]
  %v654 = vld [vmem:[%s1 + $0x4ac] sm:$0xf]
  %v655 = vld [vmem:[%s1 + $0x4b0] sm:$0xf]
  %v656 = vld [vmem:[%s1 + $0x4b4] sm:$0xf]
  %v657 = vld [vmem:[%s1 + $0x4b8] sm:$0xf]
  %v658 = vld [vmem:[%s1 + $0x4bc] sm:$0xf]
  %v659 = vld [vmem:[%s1 + $0x4c0] sm:$0xf]
  %v660 = vld [vmem:[%s1 + $0x4c4] sm:$0xf]
  %v661 = vld [vmem:[%s1 + $0x4c8] sm:$0xf]
  %v662 = vld [vmem:[%s1 + $0x4cc] sm:$0xf]
  %v663 = vld [vmem:[%s1 + $0x4d0] sm:$0xf]
  %v664 = vld [vmem:[%s1 + $0x4d4] sm:$0xf]
  %v665 = vld [vmem:[%s1 + $0x4d8] sm:$0xf]
  %v666 = vld [vmem:[%s1 + $0x4dc] sm:$0xf]
  %v667 = vld [vmem:[%s1 + $0x4e0] sm:$0xf]
  %v668 = vld [vmem:[%s1 + $0x4e4] sm:$0xf]
  %v669 = vld [vmem:[%s1 + $0x4e8] sm:$0xf]
  %v670 = vld [vmem:[%s1 + $0x4ec] sm:$0xf]
  %v671 = vld [vmem:[%s1 + $0x4f0] sm:$0xf]
  %v672 = vld [vmem:[%s1 + $0x4f4] sm:$0xf]
  %v673 = vld [vmem:[%s1 + $0x4f8] sm:$0xf]
  %v674 = vld [vmem:[%s1 + $0x4fc] sm:$0xf]
  %v675 = vld [vmem:[%s1 + $0x500] sm:$0xf]
  %v676 = vld [vmem:[%s1 + $0x504] sm:$0xf]
  %v677 = vld [vmem:[%s1 + $0x508] sm:$0xf]
  %v678 = vld [vmem:[%s1 + $0x50c] sm:$0xf]
  %v679 = vld [vmem:[%s1 + $0x510] sm:$0xf]
  %v680 = vld [vmem:[%s1 + $0x514] sm:$0xf]
  %v681 = vld [vmem:[%s1 + $0x518] sm:$0xf]
  %v682 = vld [vmem:[%s1 + $0x51c] sm:$0xf]
  %v683 = vld [vmem:[%s1 + $0x520] sm:$0xf]
  %v684 = vld [vmem:[%s1 + $0x524] sm:$0xf]
  %v685 = vld [vmem:[%s1 + $0x528] sm:$0xf]
  %v686 = vld [vmem:[%s1 + $0x52c] sm:$0xf]
  %v687 = vld [vmem:[%s1 + $0x530] sm:$0xf]
  %v688 = vld [vmem:[%s1 + $0x534] sm:$0xf]
  %v689 = vld [vmem:[%s1 + $0x538] sm:$0xf]
  %v690 = vld [vmem:[%s1 + $0x53c] sm:$0xf]
  %v691 = vld [vmem:[%s1 + $0x540] sm:$0xf]
  %v692 = vld [vmem:[%s1 + $0x544] sm:$0xf]
  %v693 = vld [vmem:[%s1 + $0x548] sm:$0xf]
  %v694 = vld [vmem:[%s1 + $0x54c] sm:$0xf]
  %v695 = vld [vmem:[%s1 + $0x550] sm:$0xf]
  %v696 = vld [vmem:[%s1 + $0x554] sm:$0xf]
  %v697 = vld [vmem:[%s1 + $0x558] sm:$0xf]
  %v698 = vld [vmem:[%s1 + $0x55c] sm:$0xf]
  %v699 = vld [vmem:[%s1 + $0x560] sm:$0xf]
  %v700 = vld [vmem:[%s1 + $0x564] sm:$0xf]
  %v701 = vld [vmem:[%s1 + $0x568] sm:$0xf]
  %v702 = vld [vmem:[%s1 + $0x56c] sm:$0xf]
  %v703 = vld [vmem:[%s1 + $0x570] sm:$0xf]
  %v704 = vld [vmem:[%s1 + $0x574] sm:$0xf]
  %v705 = vld [vmem:[%s1 + $0x578] sm:$0xf]
  %v706 = vld [vmem:[%s1 + $0x57c] sm:$0xf]
  %v707 = vld [vmem:[%s1 + $0x580] sm:$0xf]
  %v708 = vld [vmem:[%s1 + $0x584] sm:$0xf]
  %v709 = vld [vmem:[%s1 + $0x588] sm:$0xf]
  %v710 = vld [vmem:[%s1 + $0x58c] sm:$0xf]
  %v711 = vld [vmem:[%s1 + $0x590] sm:$0xf]
  %v712 = vld [vmem:[%s1 + $0x594] sm:$0xf]
  %v713 = vld [vmem:[%s1 + $0x598] sm:$0xf]
  %v714 = vld [vmem:[%s1 + $0x59c] sm:$0xf]
  %v715 = vld [vmem:[%s1 + $0x5a0] sm:$0xf]
  %v716 = vld [vmem:[%s1 + $0x5a4] sm:$0xf]
  %v717 = vld [vmem:[%s1 + $0x5a8] sm:$0xf]
  %v718 = vld [vmem:[%s1 + $0x5ac] sm:$0xf]
  %v719 = vld [vmem:[%s1 + $0x5b0] sm:$0xf]
  %v720 = vld [vmem:[%s1 + $0x5b4] sm:$0xf]
  %v721 = vld [vmem:[%s1 + $0x5b8] sm:$0xf]
  %v722 = vld [vmem:[%s1 + $0x5bc] sm:$0xf]
  %v723 = vld [vmem:[%s1 + $0x5c0] sm:$0xf]
  %v724 = vld [vmem:[%s1 + $0x5c4] sm:$0xf]
  %v725 = vld [vmem:[%s1 + $0x5c8] sm:$0xf]
  %v726 = vld [vmem:[%s1 + $0x5cc] sm:$0xf]
  %v727 = vld [vmem:[%s1 + $0x5d0] sm:$0xf]
  %v728 = vld [vmem:[%s1 + $0x5d4] sm:$0xf]
  %v729 = vld [vmem:[%s1 + $0x5d8] sm:$0xf]
  %v730 = vld [vmem:[%s1 + $0x5dc] sm:$0xf]
  %v731 = vld [vmem:[%s1 + $0x5e0] sm:$0xf]
  %v732 = vld [vmem:[%s1 + $0x5e4] sm:$0xf]
  %v733 = vld [vmem:[%s1 + $0x5e8] sm:$0xf]
  %v734 = vld [vmem:[%s1 + $0x5ec] sm:$0xf]
  %v735 = vld [vmem:[%s1 + $0x5f0] sm:$0xf]
  %v736 = vld [vmem:[%s1 + $0x5f4] sm:$0xf]
  %v737 = vld [vmem:[%s1 + $0x5f8] sm:$0xf]
  %v738 = vld [vmem:[%s1 + $0x5fc] sm:$0xf]
  %v739 = vld [vmem:[%s1 + $0x600] sm:$0xf]
  %v740 = vld [vmem:[%s1 + $0x604] sm:$0xf]
  %v741 = vld [vmem:[%s1 + $0x608] sm:$0xf]
  %v742 = vld [vmem:[%s1 + $0x60c] sm:$0xf]
  %v743 = vld [vmem:[%s1 + $0x610] sm:$0xf]
  %v744 = vld [vmem:[%s1 + $0x614] sm:$0xf]
  %v745 = vld [vmem:[%s1 + $0x618] sm:$0xf]
  %v746 = vld [vmem:[%s1 + $0x61c] sm:$0xf]
  %v747 = vld [vmem:[%s1 + $0x620] sm:$0xf]
  %v748 = vld [vmem:[%s1 + $0x624] sm:$0xf]
  %v749 = vld [vmem:[%s1 + $0x628] sm:$0xf]
  %v750 = vld [vmem:[%s1 + $0x62c] sm:$0xf]
  %v751 = vld [vmem:[%s1 + $0x630] sm:$0xf]
  %v752 = vld [vmem:[%s1 + $0x634] sm:$0xf]
  %v753 = vld [vmem:[%s1 + $0x638] sm:$0xf]
  %v754 = vld [vmem:[%s1 + $0x63c] sm:$0xf]
  %v1093 = vunpack.c.l.b16 %v17
  %v1094 = vunpack.c.h.b16 %v17
  %v1095 = vunpack.c.l.b16 %v18
  %v1096 = vunpack.c.h.b16 %v18
  %v1097 = vunpack.c.l.b16 %v19
  %v1098 = vunpack.c.h.b16 %v19
  %v1099 = vunpack.c.l.b16 %v20
  %v1100 = vunpack.c.h.b16 %v20
  %v1101 = vunpack.c.l.b16 %v21
  %v1102 = vunpack.c.h.b16 %v21
  %v1103 = vunpack.c.l.b16 %v22
  %v1104 = vunpack.c.h.b16 %v22
  %v1105 = vunpack.c.l.b16 %v23
  %v1106 = vunpack.c.h.b16 %v23
  %v1107 = vunpack.c.l.b16 %v24
  %v1108 = vunpack.c.h.b16 %v24
  %v1109 = vunpack.c.l.b16 %v25
  %v1110 = vunpack.c.h.b16 %v25
  %v1111 = vunpack.c.l.b16 %v26
  %v1112 = vunpack.c.h.b16 %v26
  %v1113 = vunpack.c.l.b16 %v27
  %v1114 = vunpack.c.h.b16 %v27
  %v1115 = vunpack.c.l.b16 %v28
  %v1116 = vunpack.c.h.b16 %v28
  %v1117 = vunpack.c.l.b16 %v29
  %v1118 = vunpack.c.l.b16 %v30
  %v1119 = vunpack.c.h.b16 %v30
  %v1120 = vunpack.c.l.b16 %v31
  %v1121 = vunpack.c.h.b16 %v31
  %v1122 = vunpack.c.l.b16 %v32
  %v1123 = vunpack.c.h.b16 %v32
  %v1124 = vunpack.c.l.b16 %v33
  %v1125 = vunpack.c.h.b16 %v33
  %v1126 = vunpack.c.l.b16 %v34
  %v1127 = vunpack.c.h.b16 %v34
  %v1128 = vunpack.c.l.b16 %v35
  %v1129 = vunpack.c.h.b16 %v35
  %v1130 = vunpack.c.l.b16 %v36
  %v1131 = vunpack.c.h.b16 %v36
  %v1132 = vunpack.c.l.b16 %v37
  %v1133 = vunpack.c.h.b16 %v37
  %v1134 = vunpack.c.l.b16 %v38
  %v1135 = vunpack.c.h.b16 %v38
  %v1136 = vunpack.c.l.b16 %v39
  %v1137 = vunpack.c.h.b16 %v39
  %v1138 = vunpack.c.l.b16 %v40
  %v1139 = vunpack.c.h.b16 %v40
  %v1140 = vunpack.c.l.b16 %v41
  %v1141 = vunpack.c.h.b16 %v41
  %v1142 = vunpack.c.l.b16 %v42
  %v1143 = vunpack.c.l.b16 %v43
  %v1144 = vunpack.c.h.b16 %v43
  %v1145 = vunpack.c.l.b16 %v44
  %v1146 = vunpack.c.h.b16 %v44
  %v1147 = vunpack.c.l.b16 %v45
  %v1148 = vunpack.c.h.b16 %v45
  %v1149 = vunpack.c.l.b16 %v46
  %v1150 = vunpack.c.h.b16 %v46
  %v1151 = vunpack.c.l.b16 %v47
  %v1152 = vunpack.c.h.b16 %v47
  %v1153 = vunpack.c.l.b16 %v48
  %v1154 = vunpack.c.h.b16 %v48
  %v1155 = vunpack.c.l.b16 %v49
  %v1156 = vunpack.c.h.b16 %v49
  %v1157 = vunpack.c.l.b16 %v50
  %v1158 = vunpack.c.h.b16 %v50
  %v1159 = vunpack.c.l.b16 %v51
  %v1160 = vunpack.c.h.b16 %v51
  %v1161 = vunpack.c.l.b16 %v52
  %v1162 = vunpack.c.h.b16 %v52
  %v1163 = vunpack.c.l.b16 %v53
  %v1164 = vunpack.c.h.b16 %v53
  %v1165 = vunpack.c.l.b16 %v54
  %v1166 = vunpack.c.h.b16 %v54
  %v1167 = vunpack.c.l.b16 %v55
  %v1168 = vunpack.c.l.b16 %v56
  %v1169 = vunpack.c.h.b16 %v56
  %v1170 = vunpack.c.l.b16 %v57
  %v1171 = vunpack.c.h.b16 %v57
  %v1172 = vunpack.c.l.b16 %v58
  %v1173 = vunpack.c.h.b16 %v58
  %v1174 = vunpack.c.l.b16 %v59
  %v1175 = vunpack.c.h.b16 %v59
  %v1176 = vunpack.c.l.b16 %v60
  %v1177 = vunpack.c.h.b16 %v60
  %v1178 = vunpack.c.l.b16 %v61
  %v1179 = vunpack.c.h.b16 %v61
  %v1180 = vunpack.c.l.b16 %v62
  %v1181 = vunpack.c.h.b16 %v62
  %v1182 = vunpack.c.l.b16 %v63
  %v1183 = vunpack.c.h.b16 %v63
  %v1184 = vunpack.c.l.b16 %v64
  %v1185 = vunpack.c.h.b16 %v64
  %v1186 = vunpack.c.l.b16 %v65
  %v1187 = vunpack.c.h.b16 %v65
  %v1188 = vunpack.c.l.b16 %v66
  %v1189 = vunpack.c.h.b16 %v66
  %v1190 = vunpack.c.l.b16 %v67
  %v1191 = vunpack.c.h.b16 %v67
  %v1192 = vunpack.c.l.b16 %v68
  %v1193 = vunpack.c.l.b16 %v69
  %v1194 = vunpack.c.h.b16 %v69
  %v1195 = vunpack.c.l.b16 %v70
  %v1196 = vunpack.c.h.b16 %v70
  %v1197 = vunpack.c.l.b16 %v71
  %v1198 = vunpack.c.h.b16 %v71
  %v1199 = vunpack.c.l.b16 %v72
  %v1200 = vunpack.c.h.b16 %v72
  %v1201 = vunpack.c.l.b16 %v73
  %v1202 = vunpack.c.h.b16 %v73
  %v1203 = vunpack.c.l.b16 %v74
  %v1204 = vunpack.c.h.b16 %v74
  %v1205 = vunpack.c.l.b16 %v75
  %v1206 = vunpack.c.h.b16 %v75
  %v1207 = vunpack.c.l.b16 %v76
  %v1208 = vunpack.c.h.b16 %v76
  %v1209 = vunpack.c.l.b16 %v77
  %v1210 = vunpack.c.h.b16 %v77
  %v1211 = vunpack.c.l.b16 %v78
  %v1212 = vunpack.c.h.b16 %v78
  %v1213 = vunpack.c.l.b16 %v79
  %v1214 = vunpack.c.h.b16 %v79
  %v1215 = vunpack.c.l.b16 %v80
  %v1216 = vunpack.c.h.b16 %v80
  %v1217 = vunpack.c.l.b16 %v81
  %v1218 = vunpack.c.l.b16 %v82
  %v1219 = vunpack.c.h.b16 %v82
  %v1220 = vunpack.c.l.b16 %v83
  %v1221 = vunpack.c.h.b16 %v83
  %v1222 = vunpack.c.l.b16 %v84
  %v1223 = vunpack.c.h.b16 %v84
  %v1224 = vunpack.c.l.b16 %v85
  %v1225 = vunpack.c.h.b16 %v85
  %v1226 = vunpack.c.l.b16 %v86
  %v1227 = vunpack.c.h.b16 %v86
  %v1228 = vunpack.c.l.b16 %v87
  %v1229 = vunpack.c.h.b16 %v87
  %v1230 = vunpack.c.l.b16 %v88
  %v1231 = vunpack.c.h.b16 %v88
  %v1232 = vunpack.c.l.b16 %v89
  %v1233 = vunpack.c.h.b16 %v89
  %v1234 = vunpack.c.l.b16 %v90
  %v1235 = vunpack.c.h.b16 %v90
  %v1236 = vunpack.c.l.b16 %v91
  %v1237 = vunpack.c.h.b16 %v91
  %v1238 = vunpack.c.l.b16 %v92
  %v1239 = vunpack.c.h.b16 %v92
  %v1240 = vunpack.c.l.b16 %v93
  %v1241 = vunpack.c.h.b16 %v93
  %v1242 = vunpack.c.l.b16 %v94
  %v1243 = vunpack.c.l.b16 %v95
  %v1244 = vunpack.c.h.b16 %v95
  %v1245 = vunpack.c.l.b16 %v96
  %v1246 = vunpack.c.h.b16 %v96
  %v1247 = vunpack.c.l.b16 %v97
  %v1248 = vunpack.c.h.b16 %v97
  %v1249 = vunpack.c.l.b16 %v98
  %v1250 = vunpack.c.h.b16 %v98
  %v1251 = vunpack.c.l.b16 %v99
  %v1252 = vunpack.c.h.b16 %v99
  %v1253 = vunpack.c.l.b16 %v100
  %v1254 = vunpack.c.h.b16 %v100
  %v1255 = vunpack.c.l.b16 %v101
  %v1256 = vunpack.c.h.b16 %v101
  %v1257 = vunpack.c.l.b16 %v102
  %v1258 = vunpack.c.h.b16 %v102
  %v1259 = vunpack.c.l.b16 %v103
  %v1260 = vunpack.c.h.b16 %v103
  %v1261 = vunpack.c.l.b16 %v104
  %v1262 = vunpack.c.h.b16 %v104
  %v1263 = vunpack.c.l.b16 %v105
  %v1264 = vunpack.c.h.b16 %v105
  %v1265 = vunpack.c.l.b16 %v106
  %v1266 = vunpack.c.h.b16 %v106
  %v1267 = vunpack.c.l.b16 %v107
  %v1268 = vunpack.c.l.b16 %v108
  %v1269 = vunpack.c.h.b16 %v108
  %v1270 = vunpack.c.l.b16 %v109
  %v1271 = vunpack.c.h.b16 %v109
  %v1272 = vunpack.c.l.b16 %v110
  %v1273 = vunpack.c.h.b16 %v110
  %v1274 = vunpack.c.l.b16 %v111
  %v1275 = vunpack.c.h.b16 %v111
  %v1276 = vunpack.c.l.b16 %v112
  %v1277 = vunpack.c.h.b16 %v112
  %v1278 = vunpack.c.l.b16 %v113
  %v1279 = vunpack.c.h.b16 %v113
  %v1280 = vunpack.c.l.b16 %v114
  %v1281 = vunpack.c.h.b16 %v114
  %v1282 = vunpack.c.l.b16 %v115
  %v1283 = vunpack.c.h.b16 %v115
  %v1284 = vunpack.c.l.b16 %v116
  %v1285 = vunpack.c.h.b16 %v116
  %v1286 = vunpack.c.l.b16 %v117
  %v1287 = vunpack.c.h.b16 %v117
  %v1288 = vunpack.c.l.b16 %v118
  %v1289 = vunpack.c.h.b16 %v118
  %v1290 = vunpack.c.l.b16 %v119
  %v1291 = vunpack.c.h.b16 %v119
  %v1292 = vunpack.c.l.b16 %v120
  %v1293 = vunpack.c.l.b16 %v121
  %v1294 = vunpack.c.h.b16 %v121
  %v1295 = vunpack.c.l.b16 %v122
  %v1296 = vunpack.c.h.b16 %v122
  %v1297 = vunpack.c.l.b16 %v123
  %v1298 = vunpack.c.h.b16 %v123
  %v1299 = vunpack.c.l.b16 %v124
  %v1300 = vunpack.c.h.b16 %v124
  %v1301 = vunpack.c.l.b16 %v125
  %v1302 = vunpack.c.h.b16 %v125
  %v1303 = vunpack.c.l.b16 %v126
  %v1304 = vunpack.c.h.b16 %v126
  %v1305 = vunpack.c.l.b16 %v127
  %v1306 = vunpack.c.h.b16 %v127
  %v1307 = vunpack.c.l.b16 %v128
  %v1308 = vunpack.c.h.b16 %v128
  %v1309 = vunpack.c.l.b16 %v129
  %v1310 = vunpack.c.h.b16 %v129
  %v1311 = vunpack.c.l.b16 %v130
  %v1312 = vunpack.c.h.b16 %v130
  %v1313 = vunpack.c.l.b16 %v131
  %v1314 = vunpack.c.h.b16 %v131
  %v1315 = vunpack.c.l.b16 %v132
  %v1316 = vunpack.c.h.b16 %v132
  %v1317 = vunpack.c.l.b16 %v133
  %v1318 = vunpack.c.l.b16 %v134
  %v1319 = vunpack.c.h.b16 %v134
  %v1320 = vunpack.c.l.b16 %v135
  %v1321 = vunpack.c.h.b16 %v135
  %v1322 = vunpack.c.l.b16 %v136
  %v1323 = vunpack.c.h.b16 %v136
  %v1324 = vunpack.c.l.b16 %v137
  %v1325 = vunpack.c.h.b16 %v137
  %v1326 = vunpack.c.l.b16 %v138
  %v1327 = vunpack.c.h.b16 %v138
  %v1328 = vunpack.c.l.b16 %v139
  %v1329 = vunpack.c.h.b16 %v139
  %v1330 = vunpack.c.l.b16 %v140
  %v1331 = vunpack.c.h.b16 %v140
  %v1332 = vunpack.c.l.b16 %v141
  %v1333 = vunpack.c.h.b16 %v141
  %v1334 = vunpack.c.l.b16 %v142
  %v1335 = vunpack.c.h.b16 %v142
  %v1336 = vunpack.c.l.b16 %v143
  %v1337 = vunpack.c.h.b16 %v143
  %v1338 = vunpack.c.l.b16 %v144
  %v1339 = vunpack.c.h.b16 %v144
  %v1340 = vunpack.c.l.b16 %v145
  %v1341 = vunpack.c.h.b16 %v145
  %v1342 = vunpack.c.l.b16 %v146
  %v1343 = vunpack.c.l.b16 %v147
  %v1344 = vunpack.c.h.b16 %v147
  %v1345 = vunpack.c.l.b16 %v148
  %v1346 = vunpack.c.h.b16 %v148
  %v1347 = vunpack.c.l.b16 %v149
  %v1348 = vunpack.c.h.b16 %v149
  %v1349 = vunpack.c.l.b16 %v150
  %v1350 = vunpack.c.h.b16 %v150
  %v1351 = vunpack.c.l.b16 %v151
  %v1352 = vunpack.c.h.b16 %v151
  %v1353 = vunpack.c.l.b16 %v152
  %v1354 = vunpack.c.h.b16 %v152
  %v1355 = vunpack.c.l.b16 %v153
  %v1356 = vunpack.c.h.b16 %v153
  %v1357 = vunpack.c.l.b16 %v154
  %v1358 = vunpack.c.h.b16 %v154
  %v1359 = vunpack.c.l.b16 %v155
  %v1360 = vunpack.c.h.b16 %v155
  %v1361 = vunpack.c.l.b16 %v156
  %v1362 = vunpack.c.h.b16 %v156
  %v1363 = vunpack.c.l.b16 %v157
  %v1364 = vunpack.c.h.b16 %v157
  %v1365 = vunpack.c.l.b16 %v158
  %v1366 = vunpack.c.h.b16 %v158
  %v1367 = vunpack.c.l.b16 %v159
  %v1368 = vunpack.c.l.b16 %v160
  %v1369 = vunpack.c.h.b16 %v160
  %v1370 = vunpack.c.l.b16 %v161
  %v1371 = vunpack.c.h.b16 %v161
  %v1372 = vunpack.c.l.b16 %v162
  %v1373 = vunpack.c.h.b16 %v162
  %v1374 = vunpack.c.l.b16 %v163
  %v1375 = vunpack.c.h.b16 %v163
  %v1376 = vunpack.c.l.b16 %v164
  %v1377 = vunpack.c.h.b16 %v164
  %v1378 = vunpack.c.l.b16 %v165
  %v1379 = vunpack.c.h.b16 %v165
  %v1380 = vunpack.c.l.b16 %v166
  %v1381 = vunpack.c.h.b16 %v166
  %v1382 = vunpack.c.l.b16 %v167
  %v1383 = vunpack.c.h.b16 %v167
  %v1384 = vunpack.c.l.b16 %v168
  %v1385 = vunpack.c.h.b16 %v168
  %v1386 = vunpack.c.l.b16 %v169
  %v1387 = vunpack.c.h.b16 %v169
  %v1388 = vunpack.c.l.b16 %v170
  %v1389 = vunpack.c.h.b16 %v170
  %v1390 = vunpack.c.l.b16 %v171
  %v1391 = vunpack.c.h.b16 %v171
  %v1392 = vunpack.c.l.b16 %v172
  %v1393 = vunpack.c.l.b16 %v173
  %v1394 = vunpack.c.h.b16 %v173
  %v1395 = vunpack.c.l.b16 %v174
  %v1396 = vunpack.c.h.b16 %v174
  %v1397 = vunpack.c.l.b16 %v175
  %v1398 = vunpack.c.h.b16 %v175
  %v1399 = vunpack.c.l.b16 %v176
  %v1400 = vunpack.c.h.b16 %v176
  %v1401 = vunpack.c.l.b16 %v177
  %v1402 = vunpack.c.h.b16 %v177
  %v1403 = vunpack.c.l.b16 %v178
  %v1404 = vunpack.c.h.b16 %v178
  %v1405 = vunpack.c.l.b16 %v179
  %v1406 = vunpack.c.h.b16 %v179
  %v1407 = vunpack.c.l.b16 %v180
  %v1408 = vunpack.c.h.b16 %v180
  %v1409 = vunpack.c.l.b16 %v181
  %v1410 = vunpack.c.h.b16 %v181
  %v1411 = vunpack.c.l.b16 %v182
  %v1412 = vunpack.c.h.b16 %v182
  %v1413 = vunpack.c.l.b16 %v183
  %v1414 = vunpack.c.h.b16 %v183
  %v1415 = vunpack.c.l.b16 %v184
  %v1416 = vunpack.c.h.b16 %v184
  %v1417 = vunpack.c.l.b16 %v185
  %v1418 = vunpack.c.l.b16 %v186
  %v1419 = vunpack.c.h.b16 %v186
  %v1420 = vunpack.c.l.b16 %v187
  %v1421 = vunpack.c.h.b16 %v187
  %v1422 = vunpack.c.l.b16 %v188
  %v1423 = vunpack.c.h.b16 %v188
  %v1424 = vunpack.c.l.b16 %v189
  %v1425 = vunpack.c.h.b16 %v189
  %v1426 = vunpack.c.l.b16 %v190
  %v1427 = vunpack.c.h.b16 %v190
  %v1428 = vunpack.c.l.b16 %v191
  %v1429 = vunpack.c.h.b16 %v191
  %v1430 = vunpack.c.l.b16 %v192
  %v1431 = vunpack.c.h.b16 %v192
  %v1432 = vunpack.c.l.b16 %v193
  %v1433 = vunpack.c.h.b16 %v193
  %v1434 = vunpack.c.l.b16 %v194
  %v1435 = vunpack.c.h.b16 %v194
  %v1436 = vunpack.c.l.b16 %v195
  %v1437 = vunpack.c.h.b16 %v195
  %v1438 = vunpack.c.l.b16 %v196
  %v1439 = vunpack.c.h.b16 %v196
  %v1440 = vunpack.c.l.b16 %v197
  %v1441 = vunpack.c.h.b16 %v197
  %v1442 = vunpack.c.l.b16 %v198
  %v1443 = vunpack.c.l.b16 %v199
  %v1444 = vunpack.c.h.b16 %v199
  %v1445 = vunpack.c.l.b16 %v200
  %v1446 = vunpack.c.h.b16 %v200
  %v1447 = vunpack.c.l.b16 %v201
  %v1448 = vunpack.c.h.b16 %v201
  %v1449 = vunpack.c.l.b16 %v202
  %v1450 = vunpack.c.h.b16 %v202
  %v1451 = vunpack.c.l.b16 %v203
  %v1452 = vunpack.c.h.b16 %v203
  %v1453 = vunpack.c.l.b16 %v204
  %v1454 = vunpack.c.h.b16 %v204
  %v1455 = vunpack.c.l.b16 %v205
  %v1456 = vunpack.c.h.b16 %v205
  %v1457 = vunpack.c.l.b16 %v206
  %v1458 = vunpack.c.h.b16 %v206
  %v1459 = vunpack.c.l.b16 %v207
  %v1460 = vunpack.c.h.b16 %v207
  %v1461 = vunpack.c.l.b16 %v208
  %v1462 = vunpack.c.h.b16 %v208
  %v1463 = vunpack.c.l.b16 %v209
  %v1464 = vunpack.c.h.b16 %v209
  %v1465 = vunpack.c.l.b16 %v210
  %v1466 = vunpack.c.h.b16 %v210
  %v1467 = vunpack.c.l.b16 %v211
  %v1468 = vunpack.c.l.b16 %v212
  %v1469 = vunpack.c.h.b16 %v212
  %v1470 = vunpack.c.l.b16 %v213
  %v1471 = vunpack.c.h.b16 %v213
  %v1472 = vunpack.c.l.b16 %v214
  %v1473 = vunpack.c.h.b16 %v214
  %v1474 = vunpack.c.l.b16 %v215
  %v1475 = vunpack.c.h.b16 %v215
  %v1476 = vunpack.c.l.b16 %v216
  %v1477 = vunpack.c.h.b16 %v216
  %v1478 = vunpack.c.l.b16 %v217
  %v1479 = vunpack.c.h.b16 %v217
  %v1480 = vunpack.c.l.b16 %v218
  %v1481 = vunpack.c.h.b16 %v218
  %v1482 = vunpack.c.l.b16 %v219
  %v1483 = vunpack.c.h.b16 %v219
  %v1484 = vunpack.c.l.b16 %v220
  %v1485 = vunpack.c.h.b16 %v220
  %v1486 = vunpack.c.l.b16 %v221
  %v1487 = vunpack.c.h.b16 %v221
  %v1488 = vunpack.c.l.b16 %v222
  %v1489 = vunpack.c.h.b16 %v222
  %v1490 = vunpack.c.l.b16 %v223
  %v1491 = vunpack.c.h.b16 %v223
  %v1492 = vunpack.c.l.b16 %v224
  %v1493 = vunpack.c.l.b16 %v225
  %v1494 = vunpack.c.h.b16 %v225
  %v1495 = vunpack.c.l.b16 %v226
  %v1496 = vunpack.c.h.b16 %v226
  %v1497 = vunpack.c.l.b16 %v227
  %v1498 = vunpack.c.h.b16 %v227
  %v1499 = vunpack.c.l.b16 %v228
  %v1500 = vunpack.c.h.b16 %v228
  %v1501 = vunpack.c.l.b16 %v229
  %v1502 = vunpack.c.h.b16 %v229
  %v1503 = vunpack.c.l.b16 %v230
  %v1504 = vunpack.c.h.b16 %v230
  %v1505 = vunpack.c.l.b16 %v231
  %v1506 = vunpack.c.h.b16 %v231
  %v1507 = vunpack.c.l.b16 %v232
  %v1508 = vunpack.c.h.b16 %v232
  %v1509 = vunpack.c.l.b16 %v233
  %v1510 = vunpack.c.h.b16 %v233
  %v1511 = vunpack.c.l.b16 %v234
  %v1512 = vunpack.c.h.b16 %v234
  %v1513 = vunpack.c.l.b16 %v235
  %v1514 = vunpack.c.h.b16 %v235
  %v1515 = vunpack.c.l.b16 %v236
  %v1516 = vunpack.c.h.b16 %v236
  %v1517 = vunpack.c.l.b16 %v237
  %v1518 = vunpack.c.l.b16 %v238
  %v1519 = vunpack.c.h.b16 %v238
  %v1520 = vunpack.c.l.b16 %v239
  %v1521 = vunpack.c.h.b16 %v239
  %v1522 = vunpack.c.l.b16 %v240
  %v1523 = vunpack.c.h.b16 %v240
  %v1524 = vunpack.c.l.b16 %v241
  %v1525 = vunpack.c.h.b16 %v241
  %v1526 = vunpack.c.l.b16 %v242
  %v1527 = vunpack.c.h.b16 %v242
  %v1528 = vunpack.c.l.b16 %v243
  %v1529 = vunpack.c.h.b16 %v243
  %v1530 = vunpack.c.l.b16 %v244
  %v1531 = vunpack.c.h.b16 %v244
  %v1532 = vunpack.c.l.b16 %v245
  %v1533 = vunpack.c.h.b16 %v245
  %v1534 = vunpack.c.l.b16 %v246
  %v1535 = vunpack.c.h.b16 %v246
  %v1536 = vunpack.c.l.b16 %v247
  %v1537 = vunpack.c.h.b16 %v247
  %v1538 = vunpack.c.l.b16 %v248
  %v1539 = vunpack.c.h.b16 %v248
  %v1540 = vunpack.c.l.b16 %v249
  %v1541 = vunpack.c.h.b16 %v249
  %v1542 = vunpack.c.l.b16 %v250
  %v1543 = vunpack.c.l.b16 %v251
  %v1544 = vunpack.c.h.b16 %v251
  %v1545 = vunpack.c.l.b16 %v252
  %v1546 = vunpack.c.h.b16 %v252
  %v1547 = vunpack.c.l.b16 %v253
  %v1548 = vunpack.c.h.b16 %v253
  %v1549 = vunpack.c.l.b16 %v254
  %v1550 = vunpack.c.h.b16 %v254
  %v1551 = vunpack.c.l.b16 %v255
  %v1552 = vunpack.c.h.b16 %v255
  %v1553 = vunpack.c.l.b16 %v256
  %v1554 = vunpack.c.h.b16 %v256
  %v1555 = vunpack.c.l.b16 %v257
  %v1556 = vunpack.c.h.b16 %v257
  %v1557 = vunpack.c.l.b16 %v258
  %v1558 = vunpack.c.h.b16 %v258
  %v1559 = vunpack.c.l.b16 %v259
  %v1560 = vunpack.c.h.b16 %v259
  %v1561 = vunpack.c.l.b16 %v260
  %v1562 = vunpack.c.h.b16 %v260
  %v1563 = vunpack.c.l.b16 %v261
  %v1564 = vunpack.c.h.b16 %v261
  %v1565 = vunpack.c.l.b16 %v262
  %v1566 = vunpack.c.h.b16 %v262
  %v1567 = vunpack.c.l.b16 %v263
  %v1568 = vunpack.c.l.b16 %v264
  %v1569 = vunpack.c.h.b16 %v264
  %v1570 = vunpack.c.l.b16 %v265
  %v1571 = vunpack.c.h.b16 %v265
  %v1572 = vunpack.c.l.b16 %v266
  %v1573 = vunpack.c.h.b16 %v266
  %v1574 = vunpack.c.l.b16 %v267
  %v1575 = vunpack.c.h.b16 %v267
  %v1576 = vunpack.c.l.b16 %v268
  %v1577 = vunpack.c.h.b16 %v268
  %v1578 = vunpack.c.l.b16 %v269
  %v1579 = vunpack.c.h.b16 %v269
  %v1580 = vunpack.c.l.b16 %v270
  %v1581 = vunpack.c.h.b16 %v270
  %v1582 = vunpack.c.l.b16 %v271
  %v1583 = vunpack.c.h.b16 %v271
  %v1584 = vunpack.c.l.b16 %v272
  %v1585 = vunpack.c.h.b16 %v272
  %v1586 = vunpack.c.l.b16 %v273
  %v1587 = vunpack.c.h.b16 %v273
  %v1588 = vunpack.c.l.b16 %v274
  %v1589 = vunpack.c.h.b16 %v274
  %v1590 = vunpack.c.l.b16 %v275
  %v1591 = vunpack.c.h.b16 %v275
  %v1592 = vunpack.c.l.b16 %v276
  %v1593 = vunpack.c.l.b16 %v277
  %v1594 = vunpack.c.h.b16 %v277
  %v1595 = vunpack.c.l.b16 %v278
  %v1596 = vunpack.c.h.b16 %v278
  %v1597 = vunpack.c.l.b16 %v279
  %v1598 = vunpack.c.h.b16 %v279
  %v1599 = vunpack.c.l.b16 %v280
  %v1600 = vunpack.c.h.b16 %v280
  %v1601 = vunpack.c.l.b16 %v281
  %v1602 = vunpack.c.h.b16 %v281
  %v1603 = vunpack.c.l.b16 %v282
  %v1604 = vunpack.c.h.b16 %v282
  %v1605 = vunpack.c.l.b16 %v283
  %v1606 = vunpack.c.h.b16 %v283
  %v1607 = vunpack.c.l.b16 %v284
  %v1608 = vunpack.c.h.b16 %v284
  %v1609 = vunpack.c.l.b16 %v285
  %v1610 = vunpack.c.h.b16 %v285
  %v1611 = vunpack.c.l.b16 %v286
  %v1612 = vunpack.c.h.b16 %v286
  %v1613 = vunpack.c.l.b16 %v287
  %v1614 = vunpack.c.h.b16 %v287
  %v1615 = vunpack.c.l.b16 %v288
  %v1616 = vunpack.c.h.b16 %v288
  %v1617 = vunpack.c.l.b16 %v289
  %v1618 = vunpack.c.l.b16 %v290
  %v1619 = vunpack.c.h.b16 %v290
  %v1620 = vunpack.c.l.b16 %v291
  %v1621 = vunpack.c.h.b16 %v291
  %v1622 = vunpack.c.l.b16 %v292
  %v1623 = vunpack.c.h.b16 %v292
  %v1624 = vunpack.c.l.b16 %v293
  %v1625 = vunpack.c.h.b16 %v293
  %v1626 = vunpack.c.l.b16 %v294
  %v1627 = vunpack.c.h.b16 %v294
  %v1628 = vunpack.c.l.b16 %v295
  %v1629 = vunpack.c.h.b16 %v295
  %v1630 = vunpack.c.l.b16 %v296
  %v1631 = vunpack.c.h.b16 %v296
  %v1632 = vunpack.c.l.b16 %v297
  %v1633 = vunpack.c.h.b16 %v297
  %v1634 = vunpack.c.l.b16 %v298
  %v1635 = vunpack.c.h.b16 %v298
  %v1636 = vunpack.c.l.b16 %v299
  %v1637 = vunpack.c.h.b16 %v299
  %v1638 = vunpack.c.l.b16 %v300
  %v1639 = vunpack.c.h.b16 %v300
  %v1640 = vunpack.c.l.b16 %v301
  %v1641 = vunpack.c.h.b16 %v301
  %v1642 = vunpack.c.l.b16 %v302
  %v1643 = vunpack.c.l.b16 %v303
  %v1644 = vunpack.c.h.b16 %v303
  %v1645 = vunpack.c.l.b16 %v304
  %v1646 = vunpack.c.h.b16 %v304
  %v1647 = vunpack.c.l.b16 %v305
  %v1648 = vunpack.c.h.b16 %v305
  %v1649 = vunpack.c.l.b16 %v306
  %v1650 = vunpack.c.h.b16 %v306
  %v1651 = vunpack.c.l.b16 %v307
  %v1652 = vunpack.c.h.b16 %v307
  %v1653 = vunpack.c.l.b16 %v308
  %v1654 = vunpack.c.h.b16 %v308
  %v1655 = vunpack.c.l.b16 %v309
  %v1656 = vunpack.c.h.b16 %v309
  %v1657 = vunpack.c.l.b16 %v310
  %v1658 = vunpack.c.h.b16 %v310
  %v1659 = vunpack.c.l.b16 %v311
  %v1660 = vunpack.c.h.b16 %v311
  %v1661 = vunpack.c.l.b16 %v312
  %v1662 = vunpack.c.h.b16 %v312
  %v1663 = vunpack.c.l.b16 %v313
  %v1664 = vunpack.c.h.b16 %v313
  %v1665 = vunpack.c.l.b16 %v314
  %v1666 = vunpack.c.h.b16 %v314
  %v1667 = vunpack.c.l.b16 %v315
  %v1668 = vunpack.c.l.b16 %v316
  %v1669 = vunpack.c.h.b16 %v316
  %v1670 = vunpack.c.l.b16 %v317
  %v1671 = vunpack.c.h.b16 %v317
  %v1672 = vunpack.c.l.b16 %v318
  %v1673 = vunpack.c.h.b16 %v318
  %v1674 = vunpack.c.l.b16 %v319
  %v1675 = vunpack.c.h.b16 %v319
  %v1676 = vunpack.c.l.b16 %v320
  %v1677 = vunpack.c.h.b16 %v320
  %v1678 = vunpack.c.l.b16 %v321
  %v1679 = vunpack.c.h.b16 %v321
  %v1680 = vunpack.c.l.b16 %v322
  %v1681 = vunpack.c.h.b16 %v322
  %v1682 = vunpack.c.l.b16 %v323
  %v1683 = vunpack.c.h.b16 %v323
  %v1684 = vunpack.c.l.b16 %v324
  %v1685 = vunpack.c.h.b16 %v324
  %v1686 = vunpack.c.l.b16 %v325
  %v1687 = vunpack.c.h.b16 %v325
  %v1688 = vunpack.c.l.b16 %v326
  %v1689 = vunpack.c.h.b16 %v326
  %v1690 = vunpack.c.l.b16 %v327
  %v1691 = vunpack.c.h.b16 %v327
  %v1692 = vunpack.c.l.b16 %v328
  %v1693 = vunpack.c.l.b16 %v329
  %v1694 = vunpack.c.h.b16 %v329
  %v1695 = vunpack.c.l.b16 %v330
  %v1696 = vunpack.c.h.b16 %v330
  %v1697 = vunpack.c.l.b16 %v331
  %v1698 = vunpack.c.h.b16 %v331
  %v1699 = vunpack.c.l.b16 %v332
  %v1700 = vunpack.c.h.b16 %v332
  %v1701 = vunpack.c.l.b16 %v333
  %v1702 = vunpack.c.h.b16 %v333
  %v1703 = vunpack.c.l.b16 %v334
  %v1704 = vunpack.c.h.b16 %v334
  %v1705 = vunpack.c.l.b16 %v335
  %v1706 = vunpack.c.h.b16 %v335
  %v1707 = vunpack.c.l.b16 %v336
  %v1708 = vunpack.c.h.b16 %v336
  %v1709 = vunpack.c.l.b16 %v337
  %v1710 = vunpack.c.h.b16 %v337
  %v1711 = vunpack.c.l.b16 %v338
  %v1712 = vunpack.c.h.b16 %v338
  %v1713 = vunpack.c.l.b16 %v339
  %v1714 = vunpack.c.h.b16 %v339
  %v1715 = vunpack.c.l.b16 %v340
  %v1716 = vunpack.c.h.b16 %v340
  %v1717 = vunpack.c.l.b16 %v341
  %v1718 = vunpack.c.l.b16 %v342
  %v1719 = vunpack.c.h.b16 %v342
  %v1720 = vunpack.c.l.b16 %v343
  %v1721 = vunpack.c.h.b16 %v343
  %v1722 = vunpack.c.l.b16 %v344
  %v1723 = vunpack.c.h.b16 %v344
  %v1724 = vunpack.c.l.b16 %v345
  %v1725 = vunpack.c.h.b16 %v345
  %v1726 = vunpack.c.l.b16 %v346
  %v1727 = vunpack.c.h.b16 %v346
  %v1728 = vunpack.c.l.b16 %v347
  %v1729 = vunpack.c.h.b16 %v347
  %v1730 = vunpack.c.l.b16 %v348
  %v1731 = vunpack.c.h.b16 %v348
  %v1732 = vunpack.c.l.b16 %v349
  %v1733 = vunpack.c.h.b16 %v349
  %v1734 = vunpack.c.l.b16 %v350
  %v1735 = vunpack.c.h.b16 %v350
  %v1736 = vunpack.c.l.b16 %v351
  %v1737 = vunpack.c.h.b16 %v351
  %v1738 = vunpack.c.l.b16 %v352
  %v1739 = vunpack.c.h.b16 %v352
  %v1740 = vunpack.c.l.b16 %v353
  %v1741 = vunpack.c.h.b16 %v353
  %v1742 = vunpack.c.l.b16 %v354
  %v1743 = vpack.c.b16 %v1118, %v1093
  %v1744 = vpack.c.b16 %v1119, %v1094
  %v1745 = vpack.c.b16 %v1120, %v1095
  %v1746 = vpack.c.b16 %v1121, %v1096
  %v1747 = vpack.c.b16 %v1122, %v1097
  %v1748 = vpack.c.b16 %v1123, %v1098
  %v1749 = vpack.c.b16 %v1124, %v1099
  %v1750 = vpack.c.b16 %v1125, %v1100
  %v1751 = vpack.c.b16 %v1126, %v1101
  %v1752 = vpack.c.b16 %v1127, %v1102
  %v1753 = vpack.c.b16 %v1128, %v1103
  %v1754 = vpack.c.b16 %v1129, %v1104
  %v1755 = vpack.c.b16 %v1130, %v1105
  %v1756 = vpack.c.b16 %v1131, %v1106
  %v1757 = vpack.c.b16 %v1132, %v1107
  %v1758 = vpack.c.b16 %v1133, %v1108
  %v1759 = vpack.c.b16 %v1134, %v1109
  %v1760 = vpack.c.b16 %v1135, %v1110
  %v1761 = vpack.c.b16 %v1136, %v1111
  %v1762 = vpack.c.b16 %v1137, %v1112
  %v1763 = vpack.c.b16 %v1138, %v1113
  %v1764 = vpack.c.b16 %v1139, %v1114
  %v1765 = vpack.c.b16 %v1140, %v1115
  %v1766 = vpack.c.b16 %v1141, %v1116
  %v1767 = vpack.c.b16 %v1142, %v1117
  %v1768 = vpack.c.b16 %v1168, %v1143
  %v1769 = vpack.c.b16 %v1169, %v1144
  %v1770 = vpack.c.b16 %v1170, %v1145
  %v1771 = vpack.c.b16 %v1171, %v1146
  %v1772 = vpack.c.b16 %v1172, %v1147
  %v1773 = vpack.c.b16 %v1173, %v1148
  %v1774 = vpack.c.b16 %v1174, %v1149
  %v1775 = vpack.c.b16 %v1175, %v1150
  %v1776 = vpack.c.b16 %v1176, %v1151
  %v1777 = vpack.c.b16 %v1177, %v1152
  %v1778 = vpack.c.b16 %v1178, %v1153
  %v1779 = vpack.c.b16 %v1179, %v1154
  %v1780 = vpack.c.b16 %v1180, %v1155
  %v1781 = vpack.c.b16 %v1181, %v1156
  %v1782 = vpack.c.b16 %v1182, %v1157
  %v1783 = vpack.c.b16 %v1183, %v1158
  %v1784 = vpack.c.b16 %v1184, %v1159
  %v1785 = vpack.c.b16 %v1185, %v1160
  %v1786 = vpack.c.b16 %v1186, %v1161
  %v1787 = vpack.c.b16 %v1187, %v1162
  %v1788 = vpack.c.b16 %v1188, %v1163
  %v1789 = vpack.c.b16 %v1189, %v1164
  %v1790 = vpack.c.b16 %v1190, %v1165
  %v1791 = vpack.c.b16 %v1191, %v1166
  %v1792 = vpack.c.b16 %v1192, %v1167
  %v1793 = vpack.c.b16 %v1218, %v1193
  %v1794 = vpack.c.b16 %v1219, %v1194
  %v1795 = vpack.c.b16 %v1220, %v1195
  %v1796 = vpack.c.b16 %v1221, %v1196
  %v1797 = vpack.c.b16 %v1222, %v1197
  %v1798 = vpack.c.b16 %v1223, %v1198
  %v1799 = vpack.c.b16 %v1224, %v1199
  %v1800 = vpack.c.b16 %v1225, %v1200
  %v1801 = vpack.c.b16 %v1226, %v1201
  %v1802 = vpack.c.b16 %v1227, %v1202
  %v1803 = vpack.c.b16 %v1228, %v1203
  %v1804 = vpack.c.b16 %v1229, %v1204
  %v1805 = vpack.c.b16 %v1230, %v1205
  %v1806 = vpack.c.b16 %v1231, %v1206
  %v1807 = vpack.c.b16 %v1232, %v1207
  %v1808 = vpack.c.b16 %v1233, %v1208
  %v1809 = vpack.c.b16 %v1234, %v1209
  %v1810 = vpack.c.b16 %v1235, %v1210
  %v1811 = vpack.c.b16 %v1236, %v1211
  %v1812 = vpack.c.b16 %v1237, %v1212
  %v1813 = vpack.c.b16 %v1238, %v1213
  %v1814 = vpack.c.b16 %v1239, %v1214
  %v1815 = vpack.c.b16 %v1240, %v1215
  %v1816 = vpack.c.b16 %v1241, %v1216
  %v1817 = vpack.c.b16 %v1242, %v1217
  %v1818 = vpack.c.b16 %v1268, %v1243
  %v1819 = vpack.c.b16 %v1269, %v1244
  %v1820 = vpack.c.b16 %v1270, %v1245
  %v1821 = vpack.c.b16 %v1271, %v1246
  %v1822 = vpack.c.b16 %v1272, %v1247
  %v1823 = vpack.c.b16 %v1273, %v1248
  %v1824 = vpack.c.b16 %v1274, %v1249
  %v1825 = vpack.c.b16 %v1275, %v1250
  %v1826 = vpack.c.b16 %v1276, %v1251
  %v1827 = vpack.c.b16 %v1277, %v1252
  %v1828 = vpack.c.b16 %v1278, %v1253
  %v1829 = vpack.c.b16 %v1279, %v1254
  %v1830 = vpack.c.b16 %v1280, %v1255
  %v1831 = vpack.c.b16 %v1281, %v1256
  %v1832 = vpack.c.b16 %v1282, %v1257
  %v1833 = vpack.c.b16 %v1283, %v1258
  %v1834 = vpack.c.b16 %v1284, %v1259
  %v1835 = vpack.c.b16 %v1285, %v1260
  %v1836 = vpack.c.b16 %v1286, %v1261
  %v1837 = vpack.c.b16 %v1287, %v1262
  %v1838 = vpack.c.b16 %v1288, %v1263
  %v1839 = vpack.c.b16 %v1289, %v1264
  %v1840 = vpack.c.b16 %v1290, %v1265
  %v1841 = vpack.c.b16 %v1291, %v1266
  %v1842 = vpack.c.b16 %v1292, %v1267
  %v1843 = vpack.c.b16 %v1318, %v1293
  %v1844 = vpack.c.b16 %v1319, %v1294
  %v1845 = vpack.c.b16 %v1320, %v1295
  %v1846 = vpack.c.b16 %v1321, %v1296
  %v1847 = vpack.c.b16 %v1322, %v1297
  %v1848 = vpack.c.b16 %v1323, %v1298
  %v1849 = vpack.c.b16 %v1324, %v1299
  %v1850 = vpack.c.b16 %v1325, %v1300
  %v1851 = vpack.c.b16 %v1326, %v1301
  %v1852 = vpack.c.b16 %v1327, %v1302
  %v1853 = vpack.c.b16 %v1328, %v1303
  %v1854 = vpack.c.b16 %v1329, %v1304
  %v1855 = vpack.c.b16 %v1330, %v1305
  %v1856 = vpack.c.b16 %v1331, %v1306
  %v1857 = vpack.c.b16 %v1332, %v1307
  %v1858 = vpack.c.b16 %v1333, %v1308
  %v1859 = vpack.c.b16 %v1334, %v1309
  %v1860 = vpack.c.b16 %v1335, %v1310
  %v1861 = vpack.c.b16 %v1336, %v1311
  %v1862 = vpack.c.b16 %v1337, %v1312
  %v1863 = vpack.c.b16 %v1338, %v1313
  %v1864 = vpack.c.b16 %v1339, %v1314
  %v1865 = vpack.c.b16 %v1340, %v1315
  %v1866 = vpack.c.b16 %v1341, %v1316
  %v1867 = vpack.c.b16 %v1342, %v1317
  %v1868 = vpack.c.b16 %v1368, %v1343
  %v1869 = vpack.c.b16 %v1369, %v1344
  %v1870 = vpack.c.b16 %v1370, %v1345
  %v1871 = vpack.c.b16 %v1371, %v1346
  %v1872 = vpack.c.b16 %v1372, %v1347
  %v1873 = vpack.c.b16 %v1373, %v1348
  %v1874 = vpack.c.b16 %v1374, %v1349
  %v1875 = vpack.c.b16 %v1375, %v1350
  %v1876 = vpack.c.b16 %v1376, %v1351
  %v1877 = vpack.c.b16 %v1377, %v1352
  %v1878 = vpack.c.b16 %v1378, %v1353
  %v1879 = vpack.c.b16 %v1379, %v1354
  %v1880 = vpack.c.b16 %v1380, %v1355
  %v1881 = vpack.c.b16 %v1381, %v1356
  %v1882 = vpack.c.b16 %v1382, %v1357
  %v1883 = vpack.c.b16 %v1383, %v1358
  %v1884 = vpack.c.b16 %v1384, %v1359
  %v1885 = vpack.c.b16 %v1385, %v1360
  %v1886 = vpack.c.b16 %v1386, %v1361
  %v1887 = vpack.c.b16 %v1387, %v1362
  %v1888 = vpack.c.b16 %v1388, %v1363
  %v1889 = vpack.c.b16 %v1389, %v1364
  %v1890 = vpack.c.b16 %v1390, %v1365
  %v1891 = vpack.c.b16 %v1391, %v1366
  %v1892 = vpack.c.b16 %v1392, %v1367
  %v1893 = vpack.c.b16 %v1418, %v1393
  %v1894 = vpack.c.b16 %v1419, %v1394
  %v1895 = vpack.c.b16 %v1420, %v1395
  %v1896 = vpack.c.b16 %v1421, %v1396
  %v1897 = vpack.c.b16 %v1422, %v1397
  %v1898 = vpack.c.b16 %v1423, %v1398
  %v1899 = vpack.c.b16 %v1424, %v1399
  %v1900 = vpack.c.b16 %v1425, %v1400
  %v1901 = vpack.c.b16 %v1426, %v1401
  %v1902 = vpack.c.b16 %v1427, %v1402
  %v1903 = vpack.c.b16 %v1428, %v1403
  %v1904 = vpack.c.b16 %v1429, %v1404
  %v1905 = vpack.c.b16 %v1430, %v1405
  %v1906 = vpack.c.b16 %v1431, %v1406
  %v1907 = vpack.c.b16 %v1432, %v1407
  %v1908 = vpack.c.b16 %v1433, %v1408
  %v1909 = vpack.c.b16 %v1434, %v1409
  %v1910 = vpack.c.b16 %v1435, %v1410
  %v1911 = vpack.c.b16 %v1436, %v1411
  %v1912 = vpack.c.b16 %v1437, %v1412
  %v1913 = vpack.c.b16 %v1438, %v1413
  %v1914 = vpack.c.b16 %v1439, %v1414
  %v1915 = vpack.c.b16 %v1440, %v1415
  %v1916 = vpack.c.b16 %v1441, %v1416
  %v1917 = vpack.c.b16 %v1442, %v1417
  %v1918 = vpack.c.b16 %v1468, %v1443
  %v1919 = vpack.c.b16 %v1469, %v1444
  %v1920 = vpack.c.b16 %v1470, %v1445
  %v1921 = vpack.c.b16 %v1471, %v1446
  %v1922 = vpack.c.b16 %v1472, %v1447
  %v1923 = vpack.c.b16 %v1473, %v1448
  %v1924 = vpack.c.b16 %v1474, %v1449
  %v1925 = vpack.c.b16 %v1475, %v1450
  %v1926 = vpack.c.b16 %v1476, %v1451
  %v1927 = vpack.c.b16 %v1477, %v1452
  %v1928 = vpack.c.b16 %v1478, %v1453
  %v1929 = vpack.c.b16 %v1479, %v1454
  %v1930 = vpack.c.b16 %v1480, %v1455
  %v1931 = vpack.c.b16 %v1481, %v1456
  %v1932 = vpack.c.b16 %v1482, %v1457
  %v1933 = vpack.c.b16 %v1483, %v1458
  %v1934 = vpack.c.b16 %v1484, %v1459
  %v1935 = vpack.c.b16 %v1485, %v1460
  %v1936 = vpack.c.b16 %v1486, %v1461
  %v1937 = vpack.c.b16 %v1487, %v1462
  %v1938 = vpack.c.b16 %v1488, %v1463
  %v1939 = vpack.c.b16 %v1489, %v1464
  %v1940 = vpack.c.b16 %v1490, %v1465
  %v1941 = vpack.c.b16 %v1491, %v1466
  %v1942 = vpack.c.b16 %v1492, %v1467
  %v1943 = vpack.c.b16 %v1518, %v1493
  %v1944 = vpack.c.b16 %v1519, %v1494
  %v1945 = vpack.c.b16 %v1520, %v1495
  %v1946 = vpack.c.b16 %v1521, %v1496
  %v1947 = vpack.c.b16 %v1522, %v1497
  %v1948 = vpack.c.b16 %v1523, %v1498
  %v1949 = vpack.c.b16 %v1524, %v1499
  %v1950 = vpack.c.b16 %v1525, %v1500
  %v1951 = vpack.c.b16 %v1526, %v1501
  %v1952 = vpack.c.b16 %v1527, %v1502
  %v1953 = vpack.c.b16 %v1528, %v1503
  %v1954 = vpack.c.b16 %v1529, %v1504
  %v1955 = vpack.c.b16 %v1530, %v1505
  %v1956 = vpack.c.b16 %v1531, %v1506
  %v1957 = vpack.c.b16 %v1532, %v1507
  %v1958 = vpack.c.b16 %v1533, %v1508
  %v1959 = vpack.c.b16 %v1534, %v1509
  %v1960 = vpack.c.b16 %v1535, %v1510
  %v1961 = vpack.c.b16 %v1536, %v1511
  %v1962 = vpack.c.b16 %v1537, %v1512
  %v1963 = vpack.c.b16 %v1538, %v1513
  %v1964 = vpack.c.b16 %v1539, %v1514
  %v1965 = vpack.c.b16 %v1540, %v1515
  %v1966 = vpack.c.b16 %v1541, %v1516
  %v1967 = vpack.c.b16 %v1542, %v1517
  %v1968 = vpack.c.b16 %v1568, %v1543
  %v1969 = vpack.c.b16 %v1569, %v1544
  %v1970 = vpack.c.b16 %v1570, %v1545
  %v1971 = vpack.c.b16 %v1571, %v1546
  %v1972 = vpack.c.b16 %v1572, %v1547
  %v1973 = vpack.c.b16 %v1573, %v1548
  %v1974 = vpack.c.b16 %v1574, %v1549
  %v1975 = vpack.c.b16 %v1575, %v1550
  %v1976 = vpack.c.b16 %v1576, %v1551
  %v1977 = vpack.c.b16 %v1577, %v1552
  %v1978 = vpack.c.b16 %v1578, %v1553
  %v1979 = vpack.c.b16 %v1579, %v1554
  %v1980 = vpack.c.b16 %v1580, %v1555
  %v1981 = vpack.c.b16 %v1581, %v1556
  %v1982 = vpack.c.b16 %v1582, %v1557
  %v1983 = vpack.c.b16 %v1583, %v1558
  %v1984 = vpack.c.b16 %v1584, %v1559
  %v1985 = vpack.c.b16 %v1585, %v1560
  %v1986 = vpack.c.b16 %v1586, %v1561
  %v1987 = vpack.c.b16 %v1587, %v1562
  %v1988 = vpack.c.b16 %v1588, %v1563
  %v1989 = vpack.c.b16 %v1589, %v1564
  %v1990 = vpack.c.b16 %v1590, %v1565
  %v1991 = vpack.c.b16 %v1591, %v1566
  %v1992 = vpack.c.b16 %v1592, %v1567
  %v1993 = vpack.c.b16 %v1618, %v1593
  %v1994 = vpack.c.b16 %v1619, %v1594
  %v1995 = vpack.c.b16 %v1620, %v1595
  %v1996 = vpack.c.b16 %v1621, %v1596
  %v1997 = vpack.c.b16 %v1622, %v1597
  %v1998 = vpack.c.b16 %v1623, %v1598
  %v1999 = vpack.c.b16 %v1624, %v1599
  %v2000 = vpack.c.b16 %v1625, %v1600
  %v2001 = vpack.c.b16 %v1626, %v1601
  %v2002 = vpack.c.b16 %v1627, %v1602
  %v2003 = vpack.c.b16 %v1628, %v1603
  %v2004 = vpack.c.b16 %v1629, %v1604
  %v2005 = vpack.c.b16 %v1630, %v1605
  %v2006 = vpack.c.b16 %v1631, %v1606
  %v2007 = vpack.c.b16 %v1632, %v1607
  %v2008 = vpack.c.b16 %v1633, %v1608
  %v2009 = vpack.c.b16 %v1634, %v1609
  %v2010 = vpack.c.b16 %v1635, %v1610
  %v2011 = vpack.c.b16 %v1636, %v1611
  %v2012 = vpack.c.b16 %v1637, %v1612
  %v2013 = vpack.c.b16 %v1638, %v1613
  %v2014 = vpack.c.b16 %v1639, %v1614
  %v2015 = vpack.c.b16 %v1640, %v1615
  %v2016 = vpack.c.b16 %v1641, %v1616
  %v2017 = vpack.c.b16 %v1642, %v1617
  %v2018 = vpack.c.b16 %v1668, %v1643
  %v2019 = vpack.c.b16 %v1669, %v1644
  %v2020 = vpack.c.b16 %v1670, %v1645
  %v2021 = vpack.c.b16 %v1671, %v1646
  %v2022 = vpack.c.b16 %v1672, %v1647
  %v2023 = vpack.c.b16 %v1673, %v1648
  %v2024 = vpack.c.b16 %v1674, %v1649
  %v2025 = vpack.c.b16 %v1675, %v1650
  %v2026 = vpack.c.b16 %v1676, %v1651
  %v2027 = vpack.c.b16 %v1677, %v1652
  %v2028 = vpack.c.b16 %v1678, %v1653
  %v2029 = vpack.c.b16 %v1679, %v1654
  %v2030 = vpack.c.b16 %v1680, %v1655
  %v2031 = vpack.c.b16 %v1681, %v1656
  %v2032 = vpack.c.b16 %v1682, %v1657
  %v2033 = vpack.c.b16 %v1683, %v1658
  %v2034 = vpack.c.b16 %v1684, %v1659
  %v2035 = vpack.c.b16 %v1685, %v1660
  %v2036 = vpack.c.b16 %v1686, %v1661
  %v2037 = vpack.c.b16 %v1687, %v1662
  %v2038 = vpack.c.b16 %v1688, %v1663
  %v2039 = vpack.c.b16 %v1689, %v1664
  %v2040 = vpack.c.b16 %v1690, %v1665
  %v2041 = vpack.c.b16 %v1691, %v1666
  %v2042 = vpack.c.b16 %v1692, %v1667
  %v2043 = vpack.c.b16 %v1718, %v1693
  %v2044 = vpack.c.b16 %v1719, %v1694
  %v2045 = vpack.c.b16 %v1720, %v1695
  %v2046 = vpack.c.b16 %v1721, %v1696
  %v2047 = vpack.c.b16 %v1722, %v1697
  %v2048 = vpack.c.b16 %v1723, %v1698
  %v2049 = vpack.c.b16 %v1724, %v1699
  %v2050 = vpack.c.b16 %v1725, %v1700
  %v2051 = vpack.c.b16 %v1726, %v1701
  %v2052 = vpack.c.b16 %v1727, %v1702
  %v2053 = vpack.c.b16 %v1728, %v1703
  %v2054 = vpack.c.b16 %v1729, %v1704
  %v2055 = vpack.c.b16 %v1730, %v1705
  %v2056 = vpack.c.b16 %v1731, %v1706
  %v2057 = vpack.c.b16 %v1732, %v1707
  %v2058 = vpack.c.b16 %v1733, %v1708
  %v2059 = vpack.c.b16 %v1734, %v1709
  %v2060 = vpack.c.b16 %v1735, %v1710
  %v2061 = vpack.c.b16 %v1736, %v1711
  %v2062 = vpack.c.b16 %v1737, %v1712
  %v2063 = vpack.c.b16 %v1738, %v1713
  %v2064 = vpack.c.b16 %v1739, %v1714
  %v2065 = vpack.c.b16 %v1740, %v1715
  %v2066 = vpack.c.b16 %v1741, %v1716
  %v2067 = vpack.c.b16 %v1742, %v1717
  %v2793 = vunpack.c.l.b16 %v355
  %v2794 = vunpack.c.l.b16 %v356
  %v2795 = vunpack.c.l.b16 %v357
  %v2796 = vunpack.c.l.b16 %v358
  %v2797 = vunpack.c.l.b16 %v359
  %v2798 = vunpack.c.l.b16 %v360
  %v2799 = vunpack.c.l.b16 %v361
  %v2800 = vunpack.c.l.b16 %v362
  %v2801 = vunpack.c.l.b16 %v363
  %v2802 = vunpack.c.l.b16 %v364
  %v2803 = vunpack.c.l.b16 %v365
  %v2804 = vunpack.c.l.b16 %v366
  %v2805 = vunpack.c.l.b16 %v367
  %v2806 = vunpack.c.l.b16 %v368
  %v2807 = vunpack.c.l.b16 %v369
  %v2808 = vunpack.c.l.b16 %v370
  %v2809 = vunpack.c.l.b16 %v371
  %v2810 = vunpack.c.l.b16 %v372
  %v2811 = vunpack.c.l.b16 %v373
  %v2812 = vunpack.c.l.b16 %v374
  %v2813 = vunpack.c.l.b16 %v375
  %v2814 = vunpack.c.l.b16 %v376
  %v2815 = vunpack.c.l.b16 %v377
  %v2816 = vunpack.c.l.b16 %v378
  %v2817 = vunpack.c.l.b16 %v379
  %v2818 = vunpack.c.l.b16 %v380
  %v2819 = vunpack.c.l.b16 %v381
  %v2820 = vunpack.c.l.b16 %v382
  %v2821 = vunpack.c.l.b16 %v383
  %v2822 = vunpack.c.l.b16 %v384
  %v2823 = vunpack.c.l.b16 %v385
  %v2824 = vunpack.c.l.b16 %v386
  %v2825 = vunpack.c.l.b16 %v387
  %v2826 = vunpack.c.l.b16 %v388
  %v2827 = vunpack.c.l.b16 %v389
  %v2828 = vunpack.c.l.b16 %v390
  %v2829 = vunpack.c.l.b16 %v391
  %v2830 = vunpack.c.l.b16 %v392
  %v2831 = vunpack.c.l.b16 %v393
  %v2832 = vunpack.c.l.b16 %v394
  %v2833 = vunpack.c.l.b16 %v395
  %v2834 = vunpack.c.l.b16 %v396
  %v2835 = vunpack.c.l.b16 %v397
  %v2836 = vunpack.c.l.b16 %v398
  %v2837 = vunpack.c.l.b16 %v399
  %v2838 = vunpack.c.l.b16 %v400
  %v2839 = vunpack.c.l.b16 %v401
  %v2840 = vunpack.c.l.b16 %v402
  %v2841 = vunpack.c.l.b16 %v403
  %v2842 = vunpack.c.l.b16 %v404
  %v2843 = vunpack.c.l.b16 %v405
  %v2844 = vunpack.c.l.b16 %v406
  %v2845 = vunpack.c.l.b16 %v407
  %v2846 = vunpack.c.l.b16 %v408
  %v2847 = vunpack.c.l.b16 %v409
  %v2848 = vunpack.c.l.b16 %v410
  %v2849 = vunpack.c.l.b16 %v411
  %v2850 = vunpack.c.l.b16 %v412
  %v2851 = vunpack.c.l.b16 %v413
  %v2852 = vunpack.c.l.b16 %v414
  %v2853 = vunpack.c.l.b16 %v415
  %v2854 = vunpack.c.l.b16 %v416
  %v2855 = vunpack.c.l.b16 %v417
  %v2856 = vunpack.c.l.b16 %v418
  %v2857 = vunpack.c.l.b16 %v419
  %v2858 = vunpack.c.l.b16 %v420
  %v2859 = vunpack.c.l.b16 %v421
  %v2860 = vunpack.c.l.b16 %v422
  %v2861 = vunpack.c.l.b16 %v423
  %v2862 = vunpack.c.l.b16 %v424
  %v2863 = vunpack.c.l.b16 %v425
  %v2864 = vunpack.c.l.b16 %v426
  %v2865 = vunpack.c.l.b16 %v427
  %v2866 = vunpack.c.l.b16 %v428
  %v2867 = vunpack.c.l.b16 %v429
  %v2868 = vunpack.c.l.b16 %v430
  %v2869 = vunpack.c.l.b16 %v431
  %v2870 = vunpack.c.l.b16 %v432
  %v2871 = vunpack.c.l.b16 %v433
  %v2872 = vunpack.c.l.b16 %v434
  %v2873 = vunpack.c.l.b16 %v435
  %v2874 = vunpack.c.l.b16 %v436
  %v2875 = vunpack.c.l.b16 %v437
  %v2876 = vunpack.c.l.b16 %v438
  %v2877 = vunpack.c.l.b16 %v439
  %v2878 = vunpack.c.l.b16 %v440
  %v2879 = vunpack.c.l.b16 %v441
  %v2880 = vunpack.c.l.b16 %v442
  %v2881 = vunpack.c.l.b16 %v443
  %v2882 = vunpack.c.l.b16 %v444
  %v2883 = vunpack.c.l.b16 %v445
  %v2884 = vunpack.c.l.b16 %v446
  %v2885 = vunpack.c.l.b16 %v447
  %v2886 = vunpack.c.l.b16 %v448
  %v2887 = vunpack.c.l.b16 %v449
  %v2888 = vunpack.c.l.b16 %v450
  %v2889 = vunpack.c.l.b16 %v451
  %v2890 = vunpack.c.l.b16 %v452
  %v2891 = vunpack.c.l.b16 %v453
  %v2892 = vunpack.c.l.b16 %v454
  %v2893 = vunpack.c.l.b16 %v455
  %v2894 = vunpack.c.l.b16 %v456
  %v2895 = vunpack.c.l.b16 %v457
  %v2896 = vunpack.c.l.b16 %v458
  %v2897 = vunpack.c.l.b16 %v459
  %v2898 = vunpack.c.l.b16 %v460
  %v2899 = vunpack.c.l.b16 %v461
  %v2900 = vunpack.c.l.b16 %v462
  %v2901 = vunpack.c.l.b16 %v463
  %v2902 = vunpack.c.l.b16 %v464
  %v2903 = vunpack.c.l.b16 %v465
  %v2904 = vunpack.c.l.b16 %v466
  %v2905 = vunpack.c.l.b16 %v467
  %v2906 = vunpack.c.l.b16 %v468
  %v2907 = vunpack.c.l.b16 %v469
  %v2908 = vunpack.c.l.b16 %v470
  %v2909 = vunpack.c.l.b16 %v471
  %v2910 = vunpack.c.l.b16 %v472
  %v2911 = vunpack.c.l.b16 %v473
  %v2912 = vunpack.c.l.b16 %v474
  %v2913 = vunpack.c.l.b16 %v475
  %v2914 = vunpack.c.l.b16 %v476
  %v2915 = vunpack.c.l.b16 %v477
  %v2916 = vunpack.c.l.b16 %v478
  %v2917 = vunpack.c.l.b16 %v479
  %v2918 = vunpack.c.l.b16 %v480
  %v2919 = vunpack.c.l.b16 %v481
  %v2920 = vunpack.c.l.b16 %v482
  %v2921 = vunpack.c.l.b16 %v483
  %v2922 = vunpack.c.l.b16 %v484
  %v2923 = vunpack.c.l.b16 %v485
  %v2924 = vunpack.c.l.b16 %v486
  %v2925 = vunpack.c.l.b16 %v487
  %v2926 = vunpack.c.l.b16 %v488
  %v2927 = vunpack.c.l.b16 %v489
  %v2928 = vunpack.c.l.b16 %v490
  %v2929 = vunpack.c.l.b16 %v491
  %v2930 = vunpack.c.l.b16 %v492
  %v2931 = vunpack.c.l.b16 %v493
  %v2932 = vunpack.c.l.b16 %v494
  %v2933 = vunpack.c.l.b16 %v495
  %v2934 = vunpack.c.l.b16 %v496
  %v2935 = vunpack.c.l.b16 %v497
  %v2936 = vunpack.c.l.b16 %v498
  %v2937 = vunpack.c.l.b16 %v499
  %v2938 = vunpack.c.l.b16 %v500
  %v2939 = vunpack.c.l.b16 %v501
  %v2940 = vunpack.c.l.b16 %v502
  %v2941 = vunpack.c.l.b16 %v503
  %v2942 = vunpack.c.l.b16 %v504
  %v2943 = vunpack.c.l.b16 %v505
  %v2944 = vunpack.c.l.b16 %v506
  %v2945 = vunpack.c.l.b16 %v507
  %v2946 = vunpack.c.l.b16 %v508
  %v2947 = vunpack.c.l.b16 %v509
  %v2948 = vunpack.c.l.b16 %v510
  %v2949 = vunpack.c.l.b16 %v511
  %v2950 = vunpack.c.l.b16 %v512
  %v2951 = vunpack.c.l.b16 %v513
  %v2952 = vunpack.c.l.b16 %v514
  %v2953 = vunpack.c.l.b16 %v515
  %v2954 = vunpack.c.l.b16 %v516
  %v2955 = vunpack.c.l.b16 %v517
  %v2956 = vunpack.c.l.b16 %v518
  %v2957 = vunpack.c.l.b16 %v519
  %v2958 = vunpack.c.l.b16 %v520
  %v2959 = vunpack.c.l.b16 %v521
  %v2960 = vunpack.c.l.b16 %v522
  %v2961 = vunpack.c.l.b16 %v523
  %v2962 = vunpack.c.l.b16 %v524
  %v2963 = vunpack.c.l.b16 %v525
  %v2964 = vunpack.c.l.b16 %v526
  %v2965 = vunpack.c.l.b16 %v527
  %v2966 = vunpack.c.l.b16 %v528
  %v2967 = vunpack.c.l.b16 %v529
  %v2968 = vunpack.c.l.b16 %v530
  %v2969 = vunpack.c.l.b16 %v531
  %v2970 = vunpack.c.l.b16 %v532
  %v2971 = vunpack.c.l.b16 %v533
  %v2972 = vunpack.c.l.b16 %v534
  %v2973 = vunpack.c.l.b16 %v535
  %v2974 = vunpack.c.l.b16 %v536
  %v2975 = vunpack.c.l.b16 %v537
  %v2976 = vunpack.c.l.b16 %v538
  %v2977 = vunpack.c.l.b16 %v539
  %v2978 = vunpack.c.l.b16 %v540
  %v2979 = vunpack.c.l.b16 %v541
  %v2980 = vunpack.c.l.b16 %v542
  %v2981 = vunpack.c.l.b16 %v543
  %v2982 = vunpack.c.l.b16 %v544
  %v2983 = vunpack.c.l.b16 %v545
  %v2984 = vunpack.c.l.b16 %v546
  %v2985 = vunpack.c.l.b16 %v547
  %v2986 = vunpack.c.l.b16 %v548
  %v2987 = vunpack.c.l.b16 %v549
  %v2988 = vunpack.c.l.b16 %v550
  %v2989 = vunpack.c.l.b16 %v551
  %v2990 = vunpack.c.l.b16 %v552
  %v2991 = vunpack.c.l.b16 %v553
  %v2992 = vunpack.c.l.b16 %v554
  %v2993 = vunpack.c.l.b16 %v555
  %v2994 = vunpack.c.l.b16 %v556
  %v2995 = vunpack.c.l.b16 %v557
  %v2996 = vunpack.c.l.b16 %v558
  %v2997 = vunpack.c.l.b16 %v559
  %v2998 = vunpack.c.l.b16 %v560
  %v2999 = vunpack.c.l.b16 %v561
  %v3000 = vunpack.c.l.b16 %v562
  %v3001 = vunpack.c.l.b16 %v563
  %v3002 = vunpack.c.l.b16 %v564
  %v3003 = vunpack.c.l.b16 %v565
  %v3004 = vunpack.c.l.b16 %v566
  %v3005 = vunpack.c.l.b16 %v567
  %v3006 = vunpack.c.l.b16 %v568
  %v3007 = vunpack.c.l.b16 %v569
  %v3008 = vunpack.c.l.b16 %v570
  %v3009 = vunpack.c.l.b16 %v571
  %v3010 = vunpack.c.l.b16 %v572
  %v3011 = vunpack.c.l.b16 %v573
  %v3012 = vunpack.c.l.b16 %v574
  %v3013 = vunpack.c.l.b16 %v575
  %v3014 = vunpack.c.l.b16 %v576
  %v3015 = vunpack.c.l.b16 %v577
  %v3016 = vunpack.c.l.b16 %v578
  %v3017 = vunpack.c.l.b16 %v579
  %v3018 = vunpack.c.l.b16 %v580
  %v3019 = vunpack.c.l.b16 %v581
  %v3020 = vunpack.c.l.b16 %v582
  %v3021 = vunpack.c.l.b16 %v583
  %v3022 = vunpack.c.l.b16 %v584
  %v3023 = vunpack.c.l.b16 %v585
  %v3024 = vunpack.c.l.b16 %v586
  %v3025 = vunpack.c.l.b16 %v587
  %v3026 = vunpack.c.l.b16 %v588
  %v3027 = vunpack.c.l.b16 %v589
  %v3028 = vunpack.c.l.b16 %v590
  %v3029 = vunpack.c.l.b16 %v591
  %v3030 = vunpack.c.l.b16 %v592
  %v3031 = vunpack.c.l.b16 %v593
  %v3032 = vunpack.c.l.b16 %v594
  %v3033 = vunpack.c.l.b16 %v595
  %v3034 = vunpack.c.l.b16 %v596
  %v3035 = vunpack.c.l.b16 %v597
  %v3036 = vunpack.c.l.b16 %v598
  %v3037 = vunpack.c.l.b16 %v599
  %v3038 = vunpack.c.l.b16 %v600
  %v3039 = vunpack.c.l.b16 %v601
  %v3040 = vunpack.c.l.b16 %v602
  %v3041 = vunpack.c.l.b16 %v603
  %v3042 = vunpack.c.l.b16 %v604
  %v3043 = vunpack.c.l.b16 %v605
  %v3044 = vunpack.c.l.b16 %v606
  %v3045 = vunpack.c.l.b16 %v607
  %v3046 = vunpack.c.l.b16 %v608
  %v3047 = vunpack.c.l.b16 %v609
  %v3048 = vunpack.c.l.b16 %v610
  %v3049 = vunpack.c.l.b16 %v611
  %v3050 = vunpack.c.l.b16 %v612
  %v3051 = vunpack.c.l.b16 %v613
  %v3052 = vunpack.c.l.b16 %v614
  %v3053 = vunpack.c.l.b16 %v615
  %v3054 = vunpack.c.l.b16 %v616
  %v3055 = vunpack.c.l.b16 %v617
  %v3056 = vunpack.c.l.b16 %v618
  %v3057 = vunpack.c.l.b16 %v619
  %v3058 = vunpack.c.l.b16 %v620
  %v3059 = vunpack.c.l.b16 %v621
  %v3060 = vunpack.c.l.b16 %v622
  %v3061 = vunpack.c.l.b16 %v623
  %v3062 = vunpack.c.l.b16 %v624
  %v3063 = vunpack.c.l.b16 %v625
  %v3064 = vunpack.c.l.b16 %v626
  %v3065 = vunpack.c.l.b16 %v627
  %v3066 = vunpack.c.l.b16 %v628
  %v3067 = vunpack.c.l.b16 %v629
  %v3068 = vunpack.c.l.b16 %v630
  %v3069 = vunpack.c.l.b16 %v631
  %v3070 = vunpack.c.l.b16 %v632
  %v3071 = vunpack.c.l.b16 %v633
  %v3072 = vunpack.c.l.b16 %v634
  %v3073 = vunpack.c.l.b16 %v635
  %v3074 = vunpack.c.l.b16 %v636
  %v3075 = vunpack.c.l.b16 %v637
  %v3076 = vunpack.c.l.b16 %v638
  %v3077 = vunpack.c.l.b16 %v639
  %v3078 = vunpack.c.l.b16 %v640
  %v3079 = vunpack.c.l.b16 %v641
  %v3080 = vunpack.c.l.b16 %v642
  %v3081 = vunpack.c.l.b16 %v643
  %v3082 = vunpack.c.l.b16 %v644
  %v3083 = vunpack.c.l.b16 %v645
  %v3084 = vunpack.c.l.b16 %v646
  %v3085 = vunpack.c.l.b16 %v647
  %v3086 = vunpack.c.l.b16 %v648
  %v3087 = vunpack.c.l.b16 %v649
  %v3088 = vunpack.c.l.b16 %v650
  %v3089 = vunpack.c.l.b16 %v651
  %v3090 = vunpack.c.l.b16 %v652
  %v3091 = vunpack.c.l.b16 %v653
  %v3092 = vunpack.c.l.b16 %v654
  %v3093 = vunpack.c.l.b16 %v655
  %v3094 = vunpack.c.l.b16 %v656
  %v3095 = vunpack.c.l.b16 %v657
  %v3096 = vunpack.c.l.b16 %v658
  %v3097 = vunpack.c.l.b16 %v659
  %v3098 = vunpack.c.l.b16 %v660
  %v3099 = vunpack.c.l.b16 %v661
  %v3100 = vunpack.c.l.b16 %v662
  %v3101 = vunpack.c.l.b16 %v663
  %v3102 = vunpack.c.l.b16 %v664
  %v3103 = vunpack.c.l.b16 %v665
  %v3104 = vunpack.c.l.b16 %v666
  %v3105 = vunpack.c.l.b16 %v667
  %v3106 = vunpack.c.l.b16 %v668
  %v3107 = vunpack.c.l.b16 %v669
  %v3108 = vunpack.c.l.b16 %v670
  %v3109 = vunpack.c.l.b16 %v671
  %v3110 = vunpack.c.l.b16 %v672
  %v3111 = vunpack.c.l.b16 %v673
  %v3112 = vunpack.c.l.b16 %v674
  %v3113 = vunpack.c.l.b16 %v675
  %v3114 = vunpack.c.l.b16 %v676
  %v3115 = vunpack.c.l.b16 %v677
  %v3116 = vunpack.c.l.b16 %v678
  %v3117 = vunpack.c.l.b16 %v679
  %v3118 = vunpack.c.l.b16 %v680
  %v3119 = vunpack.c.l.b16 %v681
  %v3120 = vunpack.c.l.b16 %v682
  %v3121 = vunpack.c.l.b16 %v683
  %v3122 = vunpack.c.l.b16 %v684
  %v3123 = vunpack.c.l.b16 %v685
  %v3124 = vunpack.c.l.b16 %v686
  %v3125 = vunpack.c.l.b16 %v687
  %v3126 = vunpack.c.l.b16 %v688
  %v3127 = vunpack.c.l.b16 %v689
  %v3128 = vunpack.c.l.b16 %v690
  %v3129 = vunpack.c.l.b16 %v691
  %v3130 = vunpack.c.l.b16 %v692
  %v3131 = vunpack.c.l.b16 %v693
  %v3132 = vunpack.c.l.b16 %v694
  %v3133 = vunpack.c.l.b16 %v695
  %v3134 = vunpack.c.l.b16 %v696
  %v3135 = vunpack.c.l.b16 %v697
  %v3136 = vunpack.c.l.b16 %v698
  %v3137 = vunpack.c.l.b16 %v699
  %v3138 = vunpack.c.l.b16 %v700
  %v3139 = vunpack.c.l.b16 %v701
  %v3140 = vunpack.c.l.b16 %v702
  %v3141 = vunpack.c.l.b16 %v703
  %v3142 = vunpack.c.l.b16 %v704
  %v3143 = vunpack.c.l.b16 %v705
  %v3144 = vunpack.c.l.b16 %v706
  %v3145 = vunpack.c.l.b16 %v707
  %v3146 = vunpack.c.l.b16 %v708
  %v3147 = vunpack.c.l.b16 %v709
  %v3148 = vunpack.c.l.b16 %v710
  %v3149 = vunpack.c.l.b16 %v711
  %v3150 = vunpack.c.l.b16 %v712
  %v3151 = vunpack.c.l.b16 %v713
  %v3152 = vunpack.c.l.b16 %v714
  %v3153 = vunpack.c.l.b16 %v715
  %v3154 = vunpack.c.l.b16 %v716
  %v3155 = vunpack.c.l.b16 %v717
  %v3156 = vunpack.c.l.b16 %v718
  %v3157 = vunpack.c.l.b16 %v719
  %v3158 = vunpack.c.l.b16 %v720
  %v3159 = vunpack.c.l.b16 %v721
  %v3160 = vunpack.c.l.b16 %v722
  %v3161 = vunpack.c.l.b16 %v723
  %v3162 = vunpack.c.l.b16 %v724
  %v3163 = vunpack.c.l.b16 %v725
  %v3164 = vunpack.c.l.b16 %v726
  %v3165 = vunpack.c.l.b16 %v727
  %v3166 = vunpack.c.l.b16 %v728
  %v3167 = vunpack.c.l.b16 %v729
  %v3168 = vunpack.c.l.b16 %v730
  %v3169 = vunpack.c.l.b16 %v731
  %v3170 = vunpack.c.l.b16 %v732
  %v3171 = vunpack.c.l.b16 %v733
  %v3172 = vunpack.c.l.b16 %v734
  %v3173 = vunpack.c.l.b16 %v735
  %v3174 = vunpack.c.l.b16 %v736
  %v3175 = vunpack.c.l.b16 %v737
  %v3176 = vunpack.c.l.b16 %v738
  %v3177 = vunpack.c.l.b16 %v739
  %v3178 = vunpack.c.l.b16 %v740
  %v3179 = vunpack.c.l.b16 %v741
  %v3180 = vunpack.c.l.b16 %v742
  %v3181 = vunpack.c.l.b16 %v743
  %v3182 = vunpack.c.l.b16 %v744
  %v3183 = vunpack.c.l.b16 %v745
  %v3184 = vunpack.c.l.b16 %v746
  %v3185 = vunpack.c.l.b16 %v747
  %v3186 = vunpack.c.l.b16 %v748
  %v3187 = vunpack.c.l.b16 %v749
  %v3188 = vunpack.c.l.b16 %v750
  %v3189 = vunpack.c.l.b16 %v751
  %v3190 = vunpack.c.l.b16 %v752
  %v3191 = vunpack.c.l.b16 %v753
  %v3192 = vunpack.c.l.b16 %v754
  %v3193 = vpack.c.b16 %v2794, %v2793
  %v3194 = vpack.c.b16 %v2796, %v2795
  %v3195 = vpack.c.b16 %v2798, %v2797
  %v3196 = vpack.c.b16 %v2800, %v2799
  %v3197 = vpack.c.b16 %v2802, %v2801
  %v3198 = vpack.c.b16 %v2804, %v2803
  %v3199 = vpack.c.b16 %v2806, %v2805
  %v3200 = vpack.c.b16 %v2808, %v2807
  %v3201 = vpack.c.b16 %v2810, %v2809
  %v3202 = vpack.c.b16 %v2812, %v2811
  %v3203 = vpack.c.b16 %v2814, %v2813
  %v3204 = vpack.c.b16 %v2816, %v2815
  %v3205 = vpack.c.b16 %v2818, %v2817
  %v3206 = vpack.c.b16 %v2820, %v2819
  %v3207 = vpack.c.b16 %v2822, %v2821
  %v3208 = vpack.c.b16 %v2824, %v2823
  %v3209 = vpack.c.b16 %v2826, %v2825
  %v3210 = vpack.c.b16 %v2828, %v2827
  %v3211 = vpack.c.b16 %v2830, %v2829
  %v3212 = vpack.c.b16 %v2832, %v2831
  %v3213 = vpack.c.b16 %v2834, %v2833
  %v3214 = vpack.c.b16 %v2836, %v2835
  %v3215 = vpack.c.b16 %v2838, %v2837
  %v3216 = vpack.c.b16 %v2840, %v2839
  %v3217 = vpack.c.b16 %v2842, %v2841
  %v3218 = vpack.c.b16 %v2844, %v2843
  %v3219 = vpack.c.b16 %v2846, %v2845
  %v3220 = vpack.c.b16 %v2848, %v2847
  %v3221 = vpack.c.b16 %v2850, %v2849
  %v3222 = vpack.c.b16 %v2852, %v2851
  %v3223 = vpack.c.b16 %v2854, %v2853
  %v3224 = vpack.c.b16 %v2856, %v2855
  %v3225 = vpack.c.b16 %v2858, %v2857
  %v3226 = vpack.c.b16 %v2860, %v2859
  %v3227 = vpack.c.b16 %v2862, %v2861
  %v3228 = vpack.c.b16 %v2864, %v2863
  %v3229 = vpack.c.b16 %v2866, %v2865
  %v3230 = vpack.c.b16 %v2868, %v2867
  %v3231 = vpack.c.b16 %v2870, %v2869
  %v3232 = vpack.c.b16 %v2872, %v2871
  %v3233 = vpack.c.b16 %v2874, %v2873
  %v3234 = vpack.c.b16 %v2876, %v2875
  %v3235 = vpack.c.b16 %v2878, %v2877
  %v3236 = vpack.c.b16 %v2880, %v2879
  %v3237 = vpack.c.b16 %v2882, %v2881
  %v3238 = vpack.c.b16 %v2884, %v2883
  %v3239 = vpack.c.b16 %v2886, %v2885
  %v3240 = vpack.c.b16 %v2888, %v2887
  %v3241 = vpack.c.b16 %v2890, %v2889
  %v3242 = vpack.c.b16 %v2892, %v2891
  %v3243 = vpack.c.b16 %v2894, %v2893
  %v3244 = vpack.c.b16 %v2896, %v2895
  %v3245 = vpack.c.b16 %v2898, %v2897
  %v3246 = vpack.c.b16 %v2900, %v2899
  %v3247 = vpack.c.b16 %v2902, %v2901
  %v3248 = vpack.c.b16 %v2904, %v2903
  %v3249 = vpack.c.b16 %v2906, %v2905
  %v3250 = vpack.c.b16 %v2908, %v2907
  %v3251 = vpack.c.b16 %v2910, %v2909
  %v3252 = vpack.c.b16 %v2912, %v2911
  %v3253 = vpack.c.b16 %v2914, %v2913
  %v3254 = vpack.c.b16 %v2916, %v2915
  %v3255 = vpack.c.b16 %v2918, %v2917
  %v3256 = vpack.c.b16 %v2920, %v2919
  %v3257 = vpack.c.b16 %v2922, %v2921
  %v3258 = vpack.c.b16 %v2924, %v2923
  %v3259 = vpack.c.b16 %v2926, %v2925
  %v3260 = vpack.c.b16 %v2928, %v2927
  %v3261 = vpack.c.b16 %v2930, %v2929
  %v3262 = vpack.c.b16 %v2932, %v2931
  %v3263 = vpack.c.b16 %v2934, %v2933
  %v3264 = vpack.c.b16 %v2936, %v2935
  %v3265 = vpack.c.b16 %v2938, %v2937
  %v3266 = vpack.c.b16 %v2940, %v2939
  %v3267 = vpack.c.b16 %v2942, %v2941
  %v3268 = vpack.c.b16 %v2944, %v2943
  %v3269 = vpack.c.b16 %v2946, %v2945
  %v3270 = vpack.c.b16 %v2948, %v2947
  %v3271 = vpack.c.b16 %v2950, %v2949
  %v3272 = vpack.c.b16 %v2952, %v2951
  %v3273 = vpack.c.b16 %v2954, %v2953
  %v3274 = vpack.c.b16 %v2956, %v2955
  %v3275 = vpack.c.b16 %v2958, %v2957
  %v3276 = vpack.c.b16 %v2960, %v2959
  %v3277 = vpack.c.b16 %v2962, %v2961
  %v3278 = vpack.c.b16 %v2964, %v2963
  %v3279 = vpack.c.b16 %v2966, %v2965
  %v3280 = vpack.c.b16 %v2968, %v2967
  %v3281 = vpack.c.b16 %v2970, %v2969
  %v3282 = vpack.c.b16 %v2972, %v2971
  %v3283 = vpack.c.b16 %v2974, %v2973
  %v3284 = vpack.c.b16 %v2976, %v2975
  %v3285 = vpack.c.b16 %v2978, %v2977
  %v3286 = vpack.c.b16 %v2980, %v2979
  %v3287 = vpack.c.b16 %v2982, %v2981
  %v3288 = vpack.c.b16 %v2984, %v2983
  %v3289 = vpack.c.b16 %v2986, %v2985
  %v3290 = vpack.c.b16 %v2988, %v2987
  %v3291 = vpack.c.b16 %v2990, %v2989
  %v3292 = vpack.c.b16 %v2992, %v2991
  %v3293 = vpack.c.b16 %v2994, %v2993
  %v3294 = vpack.c.b16 %v2996, %v2995
  %v3295 = vpack.c.b16 %v2998, %v2997
  %v3296 = vpack.c.b16 %v3000, %v2999
  %v3297 = vpack.c.b16 %v3002, %v3001
  %v3298 = vpack.c.b16 %v3004, %v3003
  %v3299 = vpack.c.b16 %v3006, %v3005
  %v3300 = vpack.c.b16 %v3008, %v3007
  %v3301 = vpack.c.b16 %v3010, %v3009
  %v3302 = vpack.c.b16 %v3012, %v3011
  %v3303 = vpack.c.b16 %v3014, %v3013
  %v3304 = vpack.c.b16 %v3016, %v3015
  %v3305 = vpack.c.b16 %v3018, %v3017
  %v3306 = vpack.c.b16 %v3020, %v3019
  %v3307 = vpack.c.b16 %v3022, %v3021
  %v3308 = vpack.c.b16 %v3024, %v3023
  %v3309 = vpack.c.b16 %v3026, %v3025
  %v3310 = vpack.c.b16 %v3028, %v3027
  %v3311 = vpack.c.b16 %v3030, %v3029
  %v3312 = vpack.c.b16 %v3032, %v3031
  %v3313 = vpack.c.b16 %v3034, %v3033
  %v3314 = vpack.c.b16 %v3036, %v3035
  %v3315 = vpack.c.b16 %v3038, %v3037
  %v3316 = vpack.c.b16 %v3040, %v3039
  %v3317 = vpack.c.b16 %v3042, %v3041
  %v3318 = vpack.c.b16 %v3044, %v3043
  %v3319 = vpack.c.b16 %v3046, %v3045
  %v3320 = vpack.c.b16 %v3048, %v3047
  %v3321 = vpack.c.b16 %v3050, %v3049
  %v3322 = vpack.c.b16 %v3052, %v3051
  %v3323 = vpack.c.b16 %v3054, %v3053
  %v3324 = vpack.c.b16 %v3056, %v3055
  %v3325 = vpack.c.b16 %v3058, %v3057
  %v3326 = vpack.c.b16 %v3060, %v3059
  %v3327 = vpack.c.b16 %v3062, %v3061
  %v3328 = vpack.c.b16 %v3064, %v3063
  %v3329 = vpack.c.b16 %v3066, %v3065
  %v3330 = vpack.c.b16 %v3068, %v3067
  %v3331 = vpack.c.b16 %v3070, %v3069
  %v3332 = vpack.c.b16 %v3072, %v3071
  %v3333 = vpack.c.b16 %v3074, %v3073
  %v3334 = vpack.c.b16 %v3076, %v3075
  %v3335 = vpack.c.b16 %v3078, %v3077
  %v3336 = vpack.c.b16 %v3080, %v3079
  %v3337 = vpack.c.b16 %v3082, %v3081
  %v3338 = vpack.c.b16 %v3084, %v3083
  %v3339 = vpack.c.b16 %v3086, %v3085
  %v3340 = vpack.c.b16 %v3088, %v3087
  %v3341 = vpack.c.b16 %v3090, %v3089
  %v3342 = vpack.c.b16 %v3092, %v3091
  %v3343 = vpack.c.b16 %v3094, %v3093
  %v3344 = vpack.c.b16 %v3096, %v3095
  %v3345 = vpack.c.b16 %v3098, %v3097
  %v3346 = vpack.c.b16 %v3100, %v3099
  %v3347 = vpack.c.b16 %v3102, %v3101
  %v3348 = vpack.c.b16 %v3104, %v3103
  %v3349 = vpack.c.b16 %v3106, %v3105
  %v3350 = vpack.c.b16 %v3108, %v3107
  %v3351 = vpack.c.b16 %v3110, %v3109
  %v3352 = vpack.c.b16 %v3112, %v3111
  %v3353 = vpack.c.b16 %v3114, %v3113
  %v3354 = vpack.c.b16 %v3116, %v3115
  %v3355 = vpack.c.b16 %v3118, %v3117
  %v3356 = vpack.c.b16 %v3120, %v3119
  %v3357 = vpack.c.b16 %v3122, %v3121
  %v3358 = vpack.c.b16 %v3124, %v3123
  %v3359 = vpack.c.b16 %v3126, %v3125
  %v3360 = vpack.c.b16 %v3128, %v3127
  %v3361 = vpack.c.b16 %v3130, %v3129
  %v3362 = vpack.c.b16 %v3132, %v3131
  %v3363 = vpack.c.b16 %v3134, %v3133
  %v3364 = vpack.c.b16 %v3136, %v3135
  %v3365 = vpack.c.b16 %v3138, %v3137
  %v3366 = vpack.c.b16 %v3140, %v3139
  %v3367 = vpack.c.b16 %v3142, %v3141
  %v3368 = vpack.c.b16 %v3144, %v3143
  %v3369 = vpack.c.b16 %v3146, %v3145
  %v3370 = vpack.c.b16 %v3148, %v3147
  %v3371 = vpack.c.b16 %v3150, %v3149
  %v3372 = vpack.c.b16 %v3152, %v3151
  %v3373 = vpack.c.b16 %v3154, %v3153
  %v3374 = vpack.c.b16 %v3156, %v3155
  %v3375 = vpack.c.b16 %v3158, %v3157
  %v3376 = vpack.c.b16 %v3160, %v3159
  %v3377 = vpack.c.b16 %v3162, %v3161
  %v3378 = vpack.c.b16 %v3164, %v3163
  %v3379 = vpack.c.b16 %v3166, %v3165
  %v3380 = vpack.c.b16 %v3168, %v3167
  %v3381 = vpack.c.b16 %v3170, %v3169
  %v3382 = vpack.c.b16 %v3172, %v3171
  %v3383 = vpack.c.b16 %v3174, %v3173
  %v3384 = vpack.c.b16 %v3176, %v3175
  %v3385 = vpack.c.b16 %v3178, %v3177
  %v3386 = vpack.c.b16 %v3180, %v3179
  %v3387 = vpack.c.b16 %v3182, %v3181
  %v3388 = vpack.c.b16 %v3184, %v3183
  %v3389 = vpack.c.b16 %v3186, %v3185
  %v3390 = vpack.c.b16 %v3188, %v3187
  %v3391 = vpack.c.b16 %v3190, %v3189
  %v3392 = vpack.c.b16 %v3192, %v3191
  %3593 = vmatpush.bf16.msra.mxu0 %v3200
  %3594 = vmatpush.bf16.msra.mxu0 %v3199
  %3595 = vmatpush.bf16.msra.mxu0 %v3198
  %3596 = vmatpush.bf16.msra.mxu0 %v3197
  %3597 = vmatpush.bf16.msra.mxu0 %v3196
  %3598 = vmatpush.bf16.msra.mxu0 %v3195
  %3599 = vmatpush.bf16.msra.mxu0 %v3194
  %3600 = vmatpush.bf16.msra.mxu0 %v3193
  %3601 = vmatmul.bf16.gmra.mxu0 %v1743
  %v3602 = vpop.f32.mrf.mxu0
  %v3603 = vadd.f32 0.0, %v3602
  %v3604 = vpop.f32.mrf.mxu0
  %v3605 = vadd.f32 0.0, %v3604
  %3606 = vmatmul.bf16.gmra.mxu0 %v1768
  %v3607 = vpop.f32.mrf.mxu0
  %v3608 = vadd.f32 0.0, %v3607
  %v3609 = vpop.f32.mrf.mxu0
  %v3610 = vadd.f32 0.0, %v3609
  %3611 = vmatmul.bf16.gmra.mxu0 %v1793
  %v3612 = vpop.f32.mrf.mxu0
  %v3613 = vadd.f32 0.0, %v3612
  %v3614 = vpop.f32.mrf.mxu0
  %v3615 = vadd.f32 0.0, %v3614
  %3616 = vmatmul.bf16.gmra.mxu0 %v1818
  %v3617 = vpop.f32.mrf.mxu0
  %v3618 = vadd.f32 0.0, %v3617
  %v3619 = vpop.f32.mrf.mxu0
  %v3620 = vadd.f32 0.0, %v3619
  %3621 = vmatmul.bf16.gmra.mxu0 %v1843
  %v3622 = vpop.f32.mrf.mxu0
  %v3623 = vadd.f32 0.0, %v3622
  %v3624 = vpop.f32.mrf.mxu0
  %v3625 = vadd.f32 0.0, %v3624
  %3626 = vmatmul.bf16.gmra.mxu0 %v1868
  %v3627 = vpop.f32.mrf.mxu0
  %v3628 = vadd.f32 0.0, %v3627
  %v3629 = vpop.f32.mrf.mxu0
  %v3630 = vadd.f32 0.0, %v3629
  %3631 = vmatmul.bf16.gmra.mxu0 %v1893
  %v3632 = vpop.f32.mrf.mxu0
  %v3633 = vadd.f32 0.0, %v3632
  %v3634 = vpop.f32.mrf.mxu0
  %v3635 = vadd.f32 0.0, %v3634
  %3636 = vmatmul.bf16.gmra.mxu0 %v1918
  %v3637 = vpop.f32.mrf.mxu0
  %v3638 = vadd.f32 0.0, %v3637
  %v3639 = vpop.f32.mrf.mxu0
  %v3640 = vadd.f32 0.0, %v3639
  %3641 = vmatmul.bf16.gmra.mxu0 %v1943
  %v3642 = vpop.f32.mrf.mxu0
  %v3643 = vadd.f32 0.0, %v3642
  %v3644 = vpop.f32.mrf.mxu0
  %v3645 = vadd.f32 0.0, %v3644
  %3646 = vmatmul.bf16.gmra.mxu0 %v1968
  %v3647 = vpop.f32.mrf.mxu0
  %v3648 = vadd.f32 0.0, %v3647
  %v3649 = vpop.f32.mrf.mxu0
  %v3650 = vadd.f32 0.0, %v3649
  %3651 = vmatmul.bf16.gmra.mxu0 %v1993
  %v3652 = vpop.f32.mrf.mxu0
  %v3653 = vadd.f32 0.0, %v3652
  %v3654 = vpop.f32.mrf.mxu0
  %v3655 = vadd.f32 0.0, %v3654
  %3656 = vmatmul.bf16.gmra.mxu0 %v2018
  %v3657 = vpop.f32.mrf.mxu0
  %v3658 = vadd.f32 0.0, %v3657
  %v3659 = vpop.f32.mrf.mxu0
  %v3660 = vadd.f32 0.0, %v3659
  %3661 = vmatmul.bf16.gmra.mxu0 %v2043
  %v3662 = vpop.f32.mrf.mxu0
  %v3663 = vadd.f32 0.0, %v3662
  %v3664 = vpop.f32.mrf.mxu0
  %v3665 = vadd.f32 0.0, %v3664
  %3666 = vdwg.mxu0
  %3667 = vmatpush.bf16.msra.mxu0 %v3208
  %3668 = vmatpush.bf16.msra.mxu0 %v3207
  %3669 = vmatpush.bf16.msra.mxu0 %v3206
  %3670 = vmatpush.bf16.msra.mxu0 %v3205
  %3671 = vmatpush.bf16.msra.mxu0 %v3204
  %3672 = vmatpush.bf16.msra.mxu0 %v3203
  %3673 = vmatpush.bf16.msra.mxu0 %v3202
  %3674 = vmatpush.bf16.msra.mxu0 %v3201
  %3675 = vmatmul.bf16.gmra.mxu0 %v1744
  %v3676 = vpop.f32.mrf.mxu0
  %v3677 = vadd.f32 %v3603, %v3676
  %v3678 = vpop.f32.mrf.mxu0
  %v3679 = vadd.f32 %v3605, %v3678
  %3680 = vmatmul.bf16.gmra.mxu0 %v1769
  %v3681 = vpop.f32.mrf.mxu0
  %v3682 = vadd.f32 %v3608, %v3681
  %v3683 = vpop.f32.mrf.mxu0
  %v3684 = vadd.f32 %v3610, %v3683
  %3685 = vmatmul.bf16.gmra.mxu0 %v1794
  %v3686 = vpop.f32.mrf.mxu0
  %v3687 = vadd.f32 %v3613, %v3686
  %v3688 = vpop.f32.mrf.mxu0
  %v3689 = vadd.f32 %v3615, %v3688
  %3690 = vmatmul.bf16.gmra.mxu0 %v1819
  %v3691 = vpop.f32.mrf.mxu0
  %v3692 = vadd.f32 %v3618, %v3691
  %v3693 = vpop.f32.mrf.mxu0
  %v3694 = vadd.f32 %v3620, %v3693
  %3695 = vmatmul.bf16.gmra.mxu0 %v1844
  %v3696 = vpop.f32.mrf.mxu0
  %v3697 = vadd.f32 %v3623, %v3696
  %v3698 = vpop.f32.mrf.mxu0
  %v3699 = vadd.f32 %v3625, %v3698
  %3700 = vmatmul.bf16.gmra.mxu0 %v1869
  %v3701 = vpop.f32.mrf.mxu0
  %v3702 = vadd.f32 %v3628, %v3701
  %v3703 = vpop.f32.mrf.mxu0
  %v3704 = vadd.f32 %v3630, %v3703
  %3705 = vmatmul.bf16.gmra.mxu0 %v1894
  %v3706 = vpop.f32.mrf.mxu0
  %v3707 = vadd.f32 %v3633, %v3706
  %v3708 = vpop.f32.mrf.mxu0
  %v3709 = vadd.f32 %v3635, %v3708
  %3710 = vmatmul.bf16.gmra.mxu0 %v1919
  %v3711 = vpop.f32.mrf.mxu0
  %v3712 = vadd.f32 %v3638, %v3711
  %v3713 = vpop.f32.mrf.mxu0
  %v3714 = vadd.f32 %v3640, %v3713
  %3715 = vmatmul.bf16.gmra.mxu0 %v1944
  %v3716 = vpop.f32.mrf.mxu0
  %v3717 = vadd.f32 %v3643, %v3716
  %v3718 = vpop.f32.mrf.mxu0
  %v3719 = vadd.f32 %v3645, %v3718
  %3720 = vmatmul.bf16.gmra.mxu0 %v1969
  %v3721 = vpop.f32.mrf.mxu0
  %v3722 = vadd.f32 %v3648, %v3721
  %v3723 = vpop.f32.mrf.mxu0
  %v3724 = vadd.f32 %v3650, %v3723
  %3725 = vmatmul.bf16.gmra.mxu0 %v1994
  %v3726 = vpop.f32.mrf.mxu0
  %v3727 = vadd.f32 %v3653, %v3726
  %v3728 = vpop.f32.mrf.mxu0
  %v3729 = vadd.f32 %v3655, %v3728
  %3730 = vmatmul.bf16.gmra.mxu0 %v2019
  %v3731 = vpop.f32.mrf.mxu0
  %v3732 = vadd.f32 %v3658, %v3731
  %v3733 = vpop.f32.mrf.mxu0
  %v3734 = vadd.f32 %v3660, %v3733
  %3735 = vmatmul.bf16.gmra.mxu0 %v2044
  %v3736 = vpop.f32.mrf.mxu0
  %v3737 = vadd.f32 %v3663, %v3736
  %v3738 = vpop.f32.mrf.mxu0
  %v3739 = vadd.f32 %v3665, %v3738
  %3740 = vdwg.mxu0
  %3741 = vmatpush.bf16.msra.mxu0 %v3216
  %3742 = vmatpush.bf16.msra.mxu0 %v3215
  %3743 = vmatpush.bf16.msra.mxu0 %v3214
  %3744 = vmatpush.bf16.msra.mxu0 %v3213
  %3745 = vmatpush.bf16.msra.mxu0 %v3212
  %3746 = vmatpush.bf16.msra.mxu0 %v3211
  %3747 = vmatpush.bf16.msra.mxu0 %v3210
  %3748 = vmatpush.bf16.msra.mxu0 %v3209
  %3749 = vmatmul.bf16.gmra.mxu0 %v1745
  %v3750 = vpop.f32.mrf.mxu0
  %v3751 = vadd.f32 %v3677, %v3750
  %v3752 = vpop.f32.mrf.mxu0
  %v3753 = vadd.f32 %v3679, %v3752
  %3754 = vmatmul.bf16.gmra.mxu0 %v1770
  %v3755 = vpop.f32.mrf.mxu0
  %v3756 = vadd.f32 %v3682, %v3755
  %v3757 = vpop.f32.mrf.mxu0
  %v3758 = vadd.f32 %v3684, %v3757
  %3759 = vmatmul.bf16.gmra.mxu0 %v1795
  %v3760 = vpop.f32.mrf.mxu0
  %v3761 = vadd.f32 %v3687, %v3760
  %v3762 = vpop.f32.mrf.mxu0
  %v3763 = vadd.f32 %v3689, %v3762
  %3764 = vmatmul.bf16.gmra.mxu0 %v1820
  %v3765 = vpop.f32.mrf.mxu0
  %v3766 = vadd.f32 %v3692, %v3765
  %v3767 = vpop.f32.mrf.mxu0
  %v3768 = vadd.f32 %v3694, %v3767
  %3769 = vmatmul.bf16.gmra.mxu0 %v1845
  %v3770 = vpop.f32.mrf.mxu0
  %v3771 = vadd.f32 %v3697, %v3770
  %v3772 = vpop.f32.mrf.mxu0
  %v3773 = vadd.f32 %v3699, %v3772
  %3774 = vmatmul.bf16.gmra.mxu0 %v1870
  %v3775 = vpop.f32.mrf.mxu0
  %v3776 = vadd.f32 %v3702, %v3775
  %v3777 = vpop.f32.mrf.mxu0
  %v3778 = vadd.f32 %v3704, %v3777
  %3779 = vmatmul.bf16.gmra.mxu0 %v1895
  %v3780 = vpop.f32.mrf.mxu0
  %v3781 = vadd.f32 %v3707, %v3780
  %v3782 = vpop.f32.mrf.mxu0
  %v3783 = vadd.f32 %v3709, %v3782
  %3784 = vmatmul.bf16.gmra.mxu0 %v1920
  %v3785 = vpop.f32.mrf.mxu0
  %v3786 = vadd.f32 %v3712, %v3785
  %v3787 = vpop.f32.mrf.mxu0
  %v3788 = vadd.f32 %v3714, %v3787
  %3789 = vmatmul.bf16.gmra.mxu0 %v1945
  %v3790 = vpop.f32.mrf.mxu0
  %v3791 = vadd.f32 %v3717, %v3790
  %v3792 = vpop.f32.mrf.mxu0
  %v3793 = vadd.f32 %v3719, %v3792
  %3794 = vmatmul.bf16.gmra.mxu0 %v1970
  %v3795 = vpop.f32.mrf.mxu0
  %v3796 = vadd.f32 %v3722, %v3795
  %v3797 = vpop.f32.mrf.mxu0
  %v3798 = vadd.f32 %v3724, %v3797
  %3799 = vmatmul.bf16.gmra.mxu0 %v1995
  %v3800 = vpop.f32.mrf.mxu0
  %v3801 = vadd.f32 %v3727, %v3800
  %v3802 = vpop.f32.mrf.mxu0
  %v3803 = vadd.f32 %v3729, %v3802
  %3804 = vmatmul.bf16.gmra.mxu0 %v2020
  %v3805 = vpop.f32.mrf.mxu0
  %v3806 = vadd.f32 %v3732, %v3805
  %v3807 = vpop.f32.mrf.mxu0
  %v3808 = vadd.f32 %v3734, %v3807
  %3809 = vmatmul.bf16.gmra.mxu0 %v2045
  %v3810 = vpop.f32.mrf.mxu0
  %v3811 = vadd.f32 %v3737, %v3810
  %v3812 = vpop.f32.mrf.mxu0
  %v3813 = vadd.f32 %v3739, %v3812
  %3814 = vdwg.mxu0
  %3815 = vmatpush.bf16.msra.mxu0 %v3224
  %3816 = vmatpush.bf16.msra.mxu0 %v3223
  %3817 = vmatpush.bf16.msra.mxu0 %v3222
  %3818 = vmatpush.bf16.msra.mxu0 %v3221
  %3819 = vmatpush.bf16.msra.mxu0 %v3220
  %3820 = vmatpush.bf16.msra.mxu0 %v3219
  %3821 = vmatpush.bf16.msra.mxu0 %v3218
  %3822 = vmatpush.bf16.msra.mxu0 %v3217
  %3823 = vmatmul.bf16.gmra.mxu0 %v1746
  %v3824 = vpop.f32.mrf.mxu0
  %v3825 = vadd.f32 %v3751, %v3824
  %v3826 = vpop.f32.mrf.mxu0
  %v3827 = vadd.f32 %v3753, %v3826
  %3828 = vmatmul.bf16.gmra.mxu0 %v1771
  %v3829 = vpop.f32.mrf.mxu0
  %v3830 = vadd.f32 %v3756, %v3829
  %v3831 = vpop.f32.mrf.mxu0
  %v3832 = vadd.f32 %v3758, %v3831
  %3833 = vmatmul.bf16.gmra.mxu0 %v1796
  %v3834 = vpop.f32.mrf.mxu0
  %v3835 = vadd.f32 %v3761, %v3834
  %v3836 = vpop.f32.mrf.mxu0
  %v3837 = vadd.f32 %v3763, %v3836
  %3838 = vmatmul.bf16.gmra.mxu0 %v1821
  %v3839 = vpop.f32.mrf.mxu0
  %v3840 = vadd.f32 %v3766, %v3839
  %v3841 = vpop.f32.mrf.mxu0
  %v3842 = vadd.f32 %v3768, %v3841
  %3843 = vmatmul.bf16.gmra.mxu0 %v1846
  %v3844 = vpop.f32.mrf.mxu0
  %v3845 = vadd.f32 %v3771, %v3844
  %v3846 = vpop.f32.mrf.mxu0
  %v3847 = vadd.f32 %v3773, %v3846
  %3848 = vmatmul.bf16.gmra.mxu0 %v1871
  %v3849 = vpop.f32.mrf.mxu0
  %v3850 = vadd.f32 %v3776, %v3849
  %v3851 = vpop.f32.mrf.mxu0
  %v3852 = vadd.f32 %v3778, %v3851
  %3853 = vmatmul.bf16.gmra.mxu0 %v1896
  %v3854 = vpop.f32.mrf.mxu0
  %v3855 = vadd.f32 %v3781, %v3854
  %v3856 = vpop.f32.mrf.mxu0
  %v3857 = vadd.f32 %v3783, %v3856
  %3858 = vmatmul.bf16.gmra.mxu0 %v1921
  %v3859 = vpop.f32.mrf.mxu0
  %v3860 = vadd.f32 %v3786, %v3859
  %v3861 = vpop.f32.mrf.mxu0
  %v3862 = vadd.f32 %v3788, %v3861
  %3863 = vmatmul.bf16.gmra.mxu0 %v1946
  %v3864 = vpop.f32.mrf.mxu0
  %v3865 = vadd.f32 %v3791, %v3864
  %v3866 = vpop.f32.mrf.mxu0
  %v3867 = vadd.f32 %v3793, %v3866
  %3868 = vmatmul.bf16.gmra.mxu0 %v1971
  %v3869 = vpop.f32.mrf.mxu0
  %v3870 = vadd.f32 %v3796, %v3869
  %v3871 = vpop.f32.mrf.mxu0
  %v3872 = vadd.f32 %v3798, %v3871
  %3873 = vmatmul.bf16.gmra.mxu0 %v1996
  %v3874 = vpop.f32.mrf.mxu0
  %v3875 = vadd.f32 %v3801, %v3874
  %v3876 = vpop.f32.mrf.mxu0
  %v3877 = vadd.f32 %v3803, %v3876
  %3878 = vmatmul.bf16.gmra.mxu0 %v2021
  %v3879 = vpop.f32.mrf.mxu0
  %v3880 = vadd.f32 %v3806, %v3879
  %v3881 = vpop.f32.mrf.mxu0
  %v3882 = vadd.f32 %v3808, %v3881
  %3883 = vmatmul.bf16.gmra.mxu0 %v2046
  %v3884 = vpop.f32.mrf.mxu0
  %v3885 = vadd.f32 %v3811, %v3884
  %v3886 = vpop.f32.mrf.mxu0
  %v3887 = vadd.f32 %v3813, %v3886
  %3888 = vdwg.mxu0
  %3889 = vmatpush.bf16.msra.mxu0 %v3232
  %3890 = vmatpush.bf16.msra.mxu0 %v3231
  %3891 = vmatpush.bf16.msra.mxu0 %v3230
  %3892 = vmatpush.bf16.msra.mxu0 %v3229
  %3893 = vmatpush.bf16.msra.mxu0 %v3228
  %3894 = vmatpush.bf16.msra.mxu0 %v3227
  %3895 = vmatpush.bf16.msra.mxu0 %v3226
  %3896 = vmatpush.bf16.msra.mxu0 %v3225
  %3897 = vmatmul.bf16.gmra.mxu0 %v1747
  %v3898 = vpop.f32.mrf.mxu0
  %v3899 = vadd.f32 %v3825, %v3898
  %v3900 = vpop.f32.mrf.mxu0
  %v3901 = vadd.f32 %v3827, %v3900
  %3902 = vmatmul.bf16.gmra.mxu0 %v1772
  %v3903 = vpop.f32.mrf.mxu0
  %v3904 = vadd.f32 %v3830, %v3903
  %v3905 = vpop.f32.mrf.mxu0
  %v3906 = vadd.f32 %v3832, %v3905
  %3907 = vmatmul.bf16.gmra.mxu0 %v1797
  %v3908 = vpop.f32.mrf.mxu0
  %v3909 = vadd.f32 %v3835, %v3908
  %v3910 = vpop.f32.mrf.mxu0
  %v3911 = vadd.f32 %v3837, %v3910
  %3912 = vmatmul.bf16.gmra.mxu0 %v1822
  %v3913 = vpop.f32.mrf.mxu0
  %v3914 = vadd.f32 %v3840, %v3913
  %v3915 = vpop.f32.mrf.mxu0
  %v3916 = vadd.f32 %v3842, %v3915
  %3917 = vmatmul.bf16.gmra.mxu0 %v1847
  %v3918 = vpop.f32.mrf.mxu0
  %v3919 = vadd.f32 %v3845, %v3918
  %v3920 = vpop.f32.mrf.mxu0
  %v3921 = vadd.f32 %v3847, %v3920
  %3922 = vmatmul.bf16.gmra.mxu0 %v1872
  %v3923 = vpop.f32.mrf.mxu0
  %v3924 = vadd.f32 %v3850, %v3923
  %v3925 = vpop.f32.mrf.mxu0
  %v3926 = vadd.f32 %v3852, %v3925
  %3927 = vmatmul.bf16.gmra.mxu0 %v1897
  %v3928 = vpop.f32.mrf.mxu0
  %v3929 = vadd.f32 %v3855, %v3928
  %v3930 = vpop.f32.mrf.mxu0
  %v3931 = vadd.f32 %v3857, %v3930
  %3932 = vmatmul.bf16.gmra.mxu0 %v1922
  %v3933 = vpop.f32.mrf.mxu0
  %v3934 = vadd.f32 %v3860, %v3933
  %v3935 = vpop.f32.mrf.mxu0
  %v3936 = vadd.f32 %v3862, %v3935
  %3937 = vmatmul.bf16.gmra.mxu0 %v1947
  %v3938 = vpop.f32.mrf.mxu0
  %v3939 = vadd.f32 %v3865, %v3938
  %v3940 = vpop.f32.mrf.mxu0
  %v3941 = vadd.f32 %v3867, %v3940
  %3942 = vmatmul.bf16.gmra.mxu0 %v1972
  %v3943 = vpop.f32.mrf.mxu0
  %v3944 = vadd.f32 %v3870, %v3943
  %v3945 = vpop.f32.mrf.mxu0
  %v3946 = vadd.f32 %v3872, %v3945
  %3947 = vmatmul.bf16.gmra.mxu0 %v1997
  %v3948 = vpop.f32.mrf.mxu0
  %v3949 = vadd.f32 %v3875, %v3948
  %v3950 = vpop.f32.mrf.mxu0
  %v3951 = vadd.f32 %v3877, %v3950
  %3952 = vmatmul.bf16.gmra.mxu0 %v2022
  %v3953 = vpop.f32.mrf.mxu0
  %v3954 = vadd.f32 %v3880, %v3953
  %v3955 = vpop.f32.mrf.mxu0
  %v3956 = vadd.f32 %v3882, %v3955
  %3957 = vmatmul.bf16.gmra.mxu0 %v2047
  %v3958 = vpop.f32.mrf.mxu0
  %v3959 = vadd.f32 %v3885, %v3958
  %v3960 = vpop.f32.mrf.mxu0
  %v3961 = vadd.f32 %v3887, %v3960
  %3962 = vdwg.mxu0
  %3963 = vmatpush.bf16.msra.mxu0 %v3240
  %3964 = vmatpush.bf16.msra.mxu0 %v3239
  %3965 = vmatpush.bf16.msra.mxu0 %v3238
  %3966 = vmatpush.bf16.msra.mxu0 %v3237
  %3967 = vmatpush.bf16.msra.mxu0 %v3236
  %3968 = vmatpush.bf16.msra.mxu0 %v3235
  %3969 = vmatpush.bf16.msra.mxu0 %v3234
  %3970 = vmatpush.bf16.msra.mxu0 %v3233
  %3971 = vmatmul.bf16.gmra.mxu0 %v1748
  %v3972 = vpop.f32.mrf.mxu0
  %v3973 = vadd.f32 %v3899, %v3972
  %v3974 = vpop.f32.mrf.mxu0
  %v3975 = vadd.f32 %v3901, %v3974
  %3976 = vmatmul.bf16.gmra.mxu0 %v1773
  %v3977 = vpop.f32.mrf.mxu0
  %v3978 = vadd.f32 %v3904, %v3977
  %v3979 = vpop.f32.mrf.mxu0
  %v3980 = vadd.f32 %v3906, %v3979
  %3981 = vmatmul.bf16.gmra.mxu0 %v1798
  %v3982 = vpop.f32.mrf.mxu0
  %v3983 = vadd.f32 %v3909, %v3982
  %v3984 = vpop.f32.mrf.mxu0
  %v3985 = vadd.f32 %v3911, %v3984
  %3986 = vmatmul.bf16.gmra.mxu0 %v1823
  %v3987 = vpop.f32.mrf.mxu0
  %v3988 = vadd.f32 %v3914, %v3987
  %v3989 = vpop.f32.mrf.mxu0
  %v3990 = vadd.f32 %v3916, %v3989
  %3991 = vmatmul.bf16.gmra.mxu0 %v1848
  %v3992 = vpop.f32.mrf.mxu0
  %v3993 = vadd.f32 %v3919, %v3992
  %v3994 = vpop.f32.mrf.mxu0
  %v3995 = vadd.f32 %v3921, %v3994
  %3996 = vmatmul.bf16.gmra.mxu0 %v1873
  %v3997 = vpop.f32.mrf.mxu0
  %v3998 = vadd.f32 %v3924, %v3997
  %v3999 = vpop.f32.mrf.mxu0
  %v4000 = vadd.f32 %v3926, %v3999
  %4001 = vmatmul.bf16.gmra.mxu0 %v1898
  %v4002 = vpop.f32.mrf.mxu0
  %v4003 = vadd.f32 %v3929, %v4002
  %v4004 = vpop.f32.mrf.mxu0
  %v4005 = vadd.f32 %v3931, %v4004
  %4006 = vmatmul.bf16.gmra.mxu0 %v1923
  %v4007 = vpop.f32.mrf.mxu0
  %v4008 = vadd.f32 %v3934, %v4007
  %v4009 = vpop.f32.mrf.mxu0
  %v4010 = vadd.f32 %v3936, %v4009
  %4011 = vmatmul.bf16.gmra.mxu0 %v1948
  %v4012 = vpop.f32.mrf.mxu0
  %v4013 = vadd.f32 %v3939, %v4012
  %v4014 = vpop.f32.mrf.mxu0
  %v4015 = vadd.f32 %v3941, %v4014
  %4016 = vmatmul.bf16.gmra.mxu0 %v1973
  %v4017 = vpop.f32.mrf.mxu0
  %v4018 = vadd.f32 %v3944, %v4017
  %v4019 = vpop.f32.mrf.mxu0
  %v4020 = vadd.f32 %v3946, %v4019
  %4021 = vmatmul.bf16.gmra.mxu0 %v1998
  %v4022 = vpop.f32.mrf.mxu0
  %v4023 = vadd.f32 %v3949, %v4022
  %v4024 = vpop.f32.mrf.mxu0
  %v4025 = vadd.f32 %v3951, %v4024
  %4026 = vmatmul.bf16.gmra.mxu0 %v2023
  %v4027 = vpop.f32.mrf.mxu0
  %v4028 = vadd.f32 %v3954, %v4027
  %v4029 = vpop.f32.mrf.mxu0
  %v4030 = vadd.f32 %v3956, %v4029
  %4031 = vmatmul.bf16.gmra.mxu0 %v2048
  %v4032 = vpop.f32.mrf.mxu0
  %v4033 = vadd.f32 %v3959, %v4032
  %v4034 = vpop.f32.mrf.mxu0
  %v4035 = vadd.f32 %v3961, %v4034
  %4036 = vdwg.mxu0
  %4037 = vmatpush.bf16.msra.mxu0 %v3248
  %4038 = vmatpush.bf16.msra.mxu0 %v3247
  %4039 = vmatpush.bf16.msra.mxu0 %v3246
  %4040 = vmatpush.bf16.msra.mxu0 %v3245
  %4041 = vmatpush.bf16.msra.mxu0 %v3244
  %4042 = vmatpush.bf16.msra.mxu0 %v3243
  %4043 = vmatpush.bf16.msra.mxu0 %v3242
  %4044 = vmatpush.bf16.msra.mxu0 %v3241
  %4045 = vmatmul.bf16.gmra.mxu0 %v1749
  %v4046 = vpop.f32.mrf.mxu0
  %v4047 = vadd.f32 %v3973, %v4046
  %v4048 = vpop.f32.mrf.mxu0
  %v4049 = vadd.f32 %v3975, %v4048
  %4050 = vmatmul.bf16.gmra.mxu0 %v1774
  %v4051 = vpop.f32.mrf.mxu0
  %v4052 = vadd.f32 %v3978, %v4051
  %v4053 = vpop.f32.mrf.mxu0
  %v4054 = vadd.f32 %v3980, %v4053
  %4055 = vmatmul.bf16.gmra.mxu0 %v1799
  %v4056 = vpop.f32.mrf.mxu0
  %v4057 = vadd.f32 %v3983, %v4056
  %v4058 = vpop.f32.mrf.mxu0
  %v4059 = vadd.f32 %v3985, %v4058
  %4060 = vmatmul.bf16.gmra.mxu0 %v1824
  %v4061 = vpop.f32.mrf.mxu0
  %v4062 = vadd.f32 %v3988, %v4061
  %v4063 = vpop.f32.mrf.mxu0
  %v4064 = vadd.f32 %v3990, %v4063
  %4065 = vmatmul.bf16.gmra.mxu0 %v1849
  %v4066 = vpop.f32.mrf.mxu0
  %v4067 = vadd.f32 %v3993, %v4066
  %v4068 = vpop.f32.mrf.mxu0
  %v4069 = vadd.f32 %v3995, %v4068
  %4070 = vmatmul.bf16.gmra.mxu0 %v1874
  %v4071 = vpop.f32.mrf.mxu0
  %v4072 = vadd.f32 %v3998, %v4071
  %v4073 = vpop.f32.mrf.mxu0
  %v4074 = vadd.f32 %v4000, %v4073
  %4075 = vmatmul.bf16.gmra.mxu0 %v1899
  %v4076 = vpop.f32.mrf.mxu0
  %v4077 = vadd.f32 %v4003, %v4076
  %v4078 = vpop.f32.mrf.mxu0
  %v4079 = vadd.f32 %v4005, %v4078
  %4080 = vmatmul.bf16.gmra.mxu0 %v1924
  %v4081 = vpop.f32.mrf.mxu0
  %v4082 = vadd.f32 %v4008, %v4081
  %v4083 = vpop.f32.mrf.mxu0
  %v4084 = vadd.f32 %v4010, %v4083
  %4085 = vmatmul.bf16.gmra.mxu0 %v1949
  %v4086 = vpop.f32.mrf.mxu0
  %v4087 = vadd.f32 %v4013, %v4086
  %v4088 = vpop.f32.mrf.mxu0
  %v4089 = vadd.f32 %v4015, %v4088
  %4090 = vmatmul.bf16.gmra.mxu0 %v1974
  %v4091 = vpop.f32.mrf.mxu0
  %v4092 = vadd.f32 %v4018, %v4091
  %v4093 = vpop.f32.mrf.mxu0
  %v4094 = vadd.f32 %v4020, %v4093
  %4095 = vmatmul.bf16.gmra.mxu0 %v1999
  %v4096 = vpop.f32.mrf.mxu0
  %v4097 = vadd.f32 %v4023, %v4096
  %v4098 = vpop.f32.mrf.mxu0
  %v4099 = vadd.f32 %v4025, %v4098
  %4100 = vmatmul.bf16.gmra.mxu0 %v2024
  %v4101 = vpop.f32.mrf.mxu0
  %v4102 = vadd.f32 %v4028, %v4101
  %v4103 = vpop.f32.mrf.mxu0
  %v4104 = vadd.f32 %v4030, %v4103
  %4105 = vmatmul.bf16.gmra.mxu0 %v2049
  %v4106 = vpop.f32.mrf.mxu0
  %v4107 = vadd.f32 %v4033, %v4106
  %v4108 = vpop.f32.mrf.mxu0
  %v4109 = vadd.f32 %v4035, %v4108
  %4110 = vdwg.mxu0
  %4111 = vmatpush.bf16.msra.mxu0 %v3256
  %4112 = vmatpush.bf16.msra.mxu0 %v3255
  %4113 = vmatpush.bf16.msra.mxu0 %v3254
  %4114 = vmatpush.bf16.msra.mxu0 %v3253
  %4115 = vmatpush.bf16.msra.mxu0 %v3252
  %4116 = vmatpush.bf16.msra.mxu0 %v3251
  %4117 = vmatpush.bf16.msra.mxu0 %v3250
  %4118 = vmatpush.bf16.msra.mxu0 %v3249
  %4119 = vmatmul.bf16.gmra.mxu0 %v1750
  %v4120 = vpop.f32.mrf.mxu0
  %v4121 = vadd.f32 %v4047, %v4120
  %v4122 = vpop.f32.mrf.mxu0
  %v4123 = vadd.f32 %v4049, %v4122
  %4124 = vmatmul.bf16.gmra.mxu0 %v1775
  %v4125 = vpop.f32.mrf.mxu0
  %v4126 = vadd.f32 %v4052, %v4125
  %v4127 = vpop.f32.mrf.mxu0
  %v4128 = vadd.f32 %v4054, %v4127
  %4129 = vmatmul.bf16.gmra.mxu0 %v1800
  %v4130 = vpop.f32.mrf.mxu0
  %v4131 = vadd.f32 %v4057, %v4130
  %v4132 = vpop.f32.mrf.mxu0
  %v4133 = vadd.f32 %v4059, %v4132
  %4134 = vmatmul.bf16.gmra.mxu0 %v1825
  %v4135 = vpop.f32.mrf.mxu0
  %v4136 = vadd.f32 %v4062, %v4135
  %v4137 = vpop.f32.mrf.mxu0
  %v4138 = vadd.f32 %v4064, %v4137
  %4139 = vmatmul.bf16.gmra.mxu0 %v1850
  %v4140 = vpop.f32.mrf.mxu0
  %v4141 = vadd.f32 %v4067, %v4140
  %v4142 = vpop.f32.mrf.mxu0
  %v4143 = vadd.f32 %v4069, %v4142
  %4144 = vmatmul.bf16.gmra.mxu0 %v1875
  %v4145 = vpop.f32.mrf.mxu0
  %v4146 = vadd.f32 %v4072, %v4145
  %v4147 = vpop.f32.mrf.mxu0
  %v4148 = vadd.f32 %v4074, %v4147
  %4149 = vmatmul.bf16.gmra.mxu0 %v1900
  %v4150 = vpop.f32.mrf.mxu0
  %v4151 = vadd.f32 %v4077, %v4150
  %v4152 = vpop.f32.mrf.mxu0
  %v4153 = vadd.f32 %v4079, %v4152
  %4154 = vmatmul.bf16.gmra.mxu0 %v1925
  %v4155 = vpop.f32.mrf.mxu0
  %v4156 = vadd.f32 %v4082, %v4155
  %v4157 = vpop.f32.mrf.mxu0
  %v4158 = vadd.f32 %v4084, %v4157
  %4159 = vmatmul.bf16.gmra.mxu0 %v1950
  %v4160 = vpop.f32.mrf.mxu0
  %v4161 = vadd.f32 %v4087, %v4160
  %v4162 = vpop.f32.mrf.mxu0
  %v4163 = vadd.f32 %v4089, %v4162
  %4164 = vmatmul.bf16.gmra.mxu0 %v1975
  %v4165 = vpop.f32.mrf.mxu0
  %v4166 = vadd.f32 %v4092, %v4165
  %v4167 = vpop.f32.mrf.mxu0
  %v4168 = vadd.f32 %v4094, %v4167
  %4169 = vmatmul.bf16.gmra.mxu0 %v2000
  %v4170 = vpop.f32.mrf.mxu0
  %v4171 = vadd.f32 %v4097, %v4170
  %v4172 = vpop.f32.mrf.mxu0
  %v4173 = vadd.f32 %v4099, %v4172
  %4174 = vmatmul.bf16.gmra.mxu0 %v2025
  %v4175 = vpop.f32.mrf.mxu0
  %v4176 = vadd.f32 %v4102, %v4175
  %v4177 = vpop.f32.mrf.mxu0
  %v4178 = vadd.f32 %v4104, %v4177
  %4179 = vmatmul.bf16.gmra.mxu0 %v2050
  %v4180 = vpop.f32.mrf.mxu0
  %v4181 = vadd.f32 %v4107, %v4180
  %v4182 = vpop.f32.mrf.mxu0
  %v4183 = vadd.f32 %v4109, %v4182
  %4184 = vdwg.mxu0
  %4185 = vmatpush.bf16.msra.mxu0 %v3264
  %4186 = vmatpush.bf16.msra.mxu0 %v3263
  %4187 = vmatpush.bf16.msra.mxu0 %v3262
  %4188 = vmatpush.bf16.msra.mxu0 %v3261
  %4189 = vmatpush.bf16.msra.mxu0 %v3260
  %4190 = vmatpush.bf16.msra.mxu0 %v3259
  %4191 = vmatpush.bf16.msra.mxu0 %v3258
  %4192 = vmatpush.bf16.msra.mxu0 %v3257
  %4193 = vmatmul.bf16.gmra.mxu0 %v1751
  %v4194 = vpop.f32.mrf.mxu0
  %v4195 = vadd.f32 %v4121, %v4194
  %v4196 = vpop.f32.mrf.mxu0
  %v4197 = vadd.f32 %v4123, %v4196
  %4198 = vmatmul.bf16.gmra.mxu0 %v1776
  %v4199 = vpop.f32.mrf.mxu0
  %v4200 = vadd.f32 %v4126, %v4199
  %v4201 = vpop.f32.mrf.mxu0
  %v4202 = vadd.f32 %v4128, %v4201
  %4203 = vmatmul.bf16.gmra.mxu0 %v1801
  %v4204 = vpop.f32.mrf.mxu0
  %v4205 = vadd.f32 %v4131, %v4204
  %v4206 = vpop.f32.mrf.mxu0
  %v4207 = vadd.f32 %v4133, %v4206
  %4208 = vmatmul.bf16.gmra.mxu0 %v1826
  %v4209 = vpop.f32.mrf.mxu0
  %v4210 = vadd.f32 %v4136, %v4209
  %v4211 = vpop.f32.mrf.mxu0
  %v4212 = vadd.f32 %v4138, %v4211
  %4213 = vmatmul.bf16.gmra.mxu0 %v1851
  %v4214 = vpop.f32.mrf.mxu0
  %v4215 = vadd.f32 %v4141, %v4214
  %v4216 = vpop.f32.mrf.mxu0
  %v4217 = vadd.f32 %v4143, %v4216
  %4218 = vmatmul.bf16.gmra.mxu0 %v1876
  %v4219 = vpop.f32.mrf.mxu0
  %v4220 = vadd.f32 %v4146, %v4219
  %v4221 = vpop.f32.mrf.mxu0
  %v4222 = vadd.f32 %v4148, %v4221
  %4223 = vmatmul.bf16.gmra.mxu0 %v1901
  %v4224 = vpop.f32.mrf.mxu0
  %v4225 = vadd.f32 %v4151, %v4224
  %v4226 = vpop.f32.mrf.mxu0
  %v4227 = vadd.f32 %v4153, %v4226
  %4228 = vmatmul.bf16.gmra.mxu0 %v1926
  %v4229 = vpop.f32.mrf.mxu0
  %v4230 = vadd.f32 %v4156, %v4229
  %v4231 = vpop.f32.mrf.mxu0
  %v4232 = vadd.f32 %v4158, %v4231
  %4233 = vmatmul.bf16.gmra.mxu0 %v1951
  %v4234 = vpop.f32.mrf.mxu0
  %v4235 = vadd.f32 %v4161, %v4234
  %v4236 = vpop.f32.mrf.mxu0
  %v4237 = vadd.f32 %v4163, %v4236
  %4238 = vmatmul.bf16.gmra.mxu0 %v1976
  %v4239 = vpop.f32.mrf.mxu0
  %v4240 = vadd.f32 %v4166, %v4239
  %v4241 = vpop.f32.mrf.mxu0
  %v4242 = vadd.f32 %v4168, %v4241
  %4243 = vmatmul.bf16.gmra.mxu0 %v2001
  %v4244 = vpop.f32.mrf.mxu0
  %v4245 = vadd.f32 %v4171, %v4244
  %v4246 = vpop.f32.mrf.mxu0
  %v4247 = vadd.f32 %v4173, %v4246
  %4248 = vmatmul.bf16.gmra.mxu0 %v2026
  %v4249 = vpop.f32.mrf.mxu0
  %v4250 = vadd.f32 %v4176, %v4249
  %v4251 = vpop.f32.mrf.mxu0
  %v4252 = vadd.f32 %v4178, %v4251
  %4253 = vmatmul.bf16.gmra.mxu0 %v2051
  %v4254 = vpop.f32.mrf.mxu0
  %v4255 = vadd.f32 %v4181, %v4254
  %v4256 = vpop.f32.mrf.mxu0
  %v4257 = vadd.f32 %v4183, %v4256
  %4258 = vdwg.mxu0
  %4259 = vmatpush.bf16.msra.mxu0 %v3272
  %4260 = vmatpush.bf16.msra.mxu0 %v3271
  %4261 = vmatpush.bf16.msra.mxu0 %v3270
  %4262 = vmatpush.bf16.msra.mxu0 %v3269
  %4263 = vmatpush.bf16.msra.mxu0 %v3268
  %4264 = vmatpush.bf16.msra.mxu0 %v3267
  %4265 = vmatpush.bf16.msra.mxu0 %v3266
  %4266 = vmatpush.bf16.msra.mxu0 %v3265
  %4267 = vmatmul.bf16.gmra.mxu0 %v1752
  %v4268 = vpop.f32.mrf.mxu0
  %v4269 = vadd.f32 %v4195, %v4268
  %v4270 = vpop.f32.mrf.mxu0
  %v4271 = vadd.f32 %v4197, %v4270
  %4272 = vmatmul.bf16.gmra.mxu0 %v1777
  %v4273 = vpop.f32.mrf.mxu0
  %v4274 = vadd.f32 %v4200, %v4273
  %v4275 = vpop.f32.mrf.mxu0
  %v4276 = vadd.f32 %v4202, %v4275
  %4277 = vmatmul.bf16.gmra.mxu0 %v1802
  %v4278 = vpop.f32.mrf.mxu0
  %v4279 = vadd.f32 %v4205, %v4278
  %v4280 = vpop.f32.mrf.mxu0
  %v4281 = vadd.f32 %v4207, %v4280
  %4282 = vmatmul.bf16.gmra.mxu0 %v1827
  %v4283 = vpop.f32.mrf.mxu0
  %v4284 = vadd.f32 %v4210, %v4283
  %v4285 = vpop.f32.mrf.mxu0
  %v4286 = vadd.f32 %v4212, %v4285
  %4287 = vmatmul.bf16.gmra.mxu0 %v1852
  %v4288 = vpop.f32.mrf.mxu0
  %v4289 = vadd.f32 %v4215, %v4288
  %v4290 = vpop.f32.mrf.mxu0
  %v4291 = vadd.f32 %v4217, %v4290
  %4292 = vmatmul.bf16.gmra.mxu0 %v1877
  %v4293 = vpop.f32.mrf.mxu0
  %v4294 = vadd.f32 %v4220, %v4293
  %v4295 = vpop.f32.mrf.mxu0
  %v4296 = vadd.f32 %v4222, %v4295
  %4297 = vmatmul.bf16.gmra.mxu0 %v1902
  %v4298 = vpop.f32.mrf.mxu0
  %v4299 = vadd.f32 %v4225, %v4298
  %v4300 = vpop.f32.mrf.mxu0
  %v4301 = vadd.f32 %v4227, %v4300
  %4302 = vmatmul.bf16.gmra.mxu0 %v1927
  %v4303 = vpop.f32.mrf.mxu0
  %v4304 = vadd.f32 %v4230, %v4303
  %v4305 = vpop.f32.mrf.mxu0
  %v4306 = vadd.f32 %v4232, %v4305
  %4307 = vmatmul.bf16.gmra.mxu0 %v1952
  %v4308 = vpop.f32.mrf.mxu0
  %v4309 = vadd.f32 %v4235, %v4308
  %v4310 = vpop.f32.mrf.mxu0
  %v4311 = vadd.f32 %v4237, %v4310
  %4312 = vmatmul.bf16.gmra.mxu0 %v1977
  %v4313 = vpop.f32.mrf.mxu0
  %v4314 = vadd.f32 %v4240, %v4313
  %v4315 = vpop.f32.mrf.mxu0
  %v4316 = vadd.f32 %v4242, %v4315
  %4317 = vmatmul.bf16.gmra.mxu0 %v2002
  %v4318 = vpop.f32.mrf.mxu0
  %v4319 = vadd.f32 %v4245, %v4318
  %v4320 = vpop.f32.mrf.mxu0
  %v4321 = vadd.f32 %v4247, %v4320
  %4322 = vmatmul.bf16.gmra.mxu0 %v2027
  %v4323 = vpop.f32.mrf.mxu0
  %v4324 = vadd.f32 %v4250, %v4323
  %v4325 = vpop.f32.mrf.mxu0
  %v4326 = vadd.f32 %v4252, %v4325
  %4327 = vmatmul.bf16.gmra.mxu0 %v2052
  %v4328 = vpop.f32.mrf.mxu0
  %v4329 = vadd.f32 %v4255, %v4328
  %v4330 = vpop.f32.mrf.mxu0
  %v4331 = vadd.f32 %v4257, %v4330
  %4332 = vdwg.mxu0
  %4333 = vmatpush.bf16.msra.mxu0 %v3280
  %4334 = vmatpush.bf16.msra.mxu0 %v3279
  %4335 = vmatpush.bf16.msra.mxu0 %v3278
  %4336 = vmatpush.bf16.msra.mxu0 %v3277
  %4337 = vmatpush.bf16.msra.mxu0 %v3276
  %4338 = vmatpush.bf16.msra.mxu0 %v3275
  %4339 = vmatpush.bf16.msra.mxu0 %v3274
  %4340 = vmatpush.bf16.msra.mxu0 %v3273
  %4341 = vmatmul.bf16.gmra.mxu0 %v1753
  %v4342 = vpop.f32.mrf.mxu0
  %v4343 = vadd.f32 %v4269, %v4342
  %v4344 = vpop.f32.mrf.mxu0
  %v4345 = vadd.f32 %v4271, %v4344
  %4346 = vmatmul.bf16.gmra.mxu0 %v1778
  %v4347 = vpop.f32.mrf.mxu0
  %v4348 = vadd.f32 %v4274, %v4347
  %v4349 = vpop.f32.mrf.mxu0
  %v4350 = vadd.f32 %v4276, %v4349
  %4351 = vmatmul.bf16.gmra.mxu0 %v1803
  %v4352 = vpop.f32.mrf.mxu0
  %v4353 = vadd.f32 %v4279, %v4352
  %v4354 = vpop.f32.mrf.mxu0
  %v4355 = vadd.f32 %v4281, %v4354
  %4356 = vmatmul.bf16.gmra.mxu0 %v1828
  %v4357 = vpop.f32.mrf.mxu0
  %v4358 = vadd.f32 %v4284, %v4357
  %v4359 = vpop.f32.mrf.mxu0
  %v4360 = vadd.f32 %v4286, %v4359
  %4361 = vmatmul.bf16.gmra.mxu0 %v1853
  %v4362 = vpop.f32.mrf.mxu0
  %v4363 = vadd.f32 %v4289, %v4362
  %v4364 = vpop.f32.mrf.mxu0
  %v4365 = vadd.f32 %v4291, %v4364
  %4366 = vmatmul.bf16.gmra.mxu0 %v1878
  %v4367 = vpop.f32.mrf.mxu0
  %v4368 = vadd.f32 %v4294, %v4367
  %v4369 = vpop.f32.mrf.mxu0
  %v4370 = vadd.f32 %v4296, %v4369
  %4371 = vmatmul.bf16.gmra.mxu0 %v1903
  %v4372 = vpop.f32.mrf.mxu0
  %v4373 = vadd.f32 %v4299, %v4372
  %v4374 = vpop.f32.mrf.mxu0
  %v4375 = vadd.f32 %v4301, %v4374
  %4376 = vmatmul.bf16.gmra.mxu0 %v1928
  %v4377 = vpop.f32.mrf.mxu0
  %v4378 = vadd.f32 %v4304, %v4377
  %v4379 = vpop.f32.mrf.mxu0
  %v4380 = vadd.f32 %v4306, %v4379
  %4381 = vmatmul.bf16.gmra.mxu0 %v1953
  %v4382 = vpop.f32.mrf.mxu0
  %v4383 = vadd.f32 %v4309, %v4382
  %v4384 = vpop.f32.mrf.mxu0
  %v4385 = vadd.f32 %v4311, %v4384
  %4386 = vmatmul.bf16.gmra.mxu0 %v1978
  %v4387 = vpop.f32.mrf.mxu0
  %v4388 = vadd.f32 %v4314, %v4387
  %v4389 = vpop.f32.mrf.mxu0
  %v4390 = vadd.f32 %v4316, %v4389
  %4391 = vmatmul.bf16.gmra.mxu0 %v2003
  %v4392 = vpop.f32.mrf.mxu0
  %v4393 = vadd.f32 %v4319, %v4392
  %v4394 = vpop.f32.mrf.mxu0
  %v4395 = vadd.f32 %v4321, %v4394
  %4396 = vmatmul.bf16.gmra.mxu0 %v2028
  %v4397 = vpop.f32.mrf.mxu0
  %v4398 = vadd.f32 %v4324, %v4397
  %v4399 = vpop.f32.mrf.mxu0
  %v4400 = vadd.f32 %v4326, %v4399
  %4401 = vmatmul.bf16.gmra.mxu0 %v2053
  %v4402 = vpop.f32.mrf.mxu0
  %v4403 = vadd.f32 %v4329, %v4402
  %v4404 = vpop.f32.mrf.mxu0
  %v4405 = vadd.f32 %v4331, %v4404
  %4406 = vdwg.mxu0
  %4407 = vmatpush.bf16.msra.mxu0 %v3288
  %4408 = vmatpush.bf16.msra.mxu0 %v3287
  %4409 = vmatpush.bf16.msra.mxu0 %v3286
  %4410 = vmatpush.bf16.msra.mxu0 %v3285
  %4411 = vmatpush.bf16.msra.mxu0 %v3284
  %4412 = vmatpush.bf16.msra.mxu0 %v3283
  %4413 = vmatpush.bf16.msra.mxu0 %v3282
  %4414 = vmatpush.bf16.msra.mxu0 %v3281
  %4415 = vmatmul.bf16.gmra.mxu0 %v1754
  %v4416 = vpop.f32.mrf.mxu0
  %v4417 = vadd.f32 %v4343, %v4416
  %v4418 = vpop.f32.mrf.mxu0
  %v4419 = vadd.f32 %v4345, %v4418
  %4420 = vmatmul.bf16.gmra.mxu0 %v1779
  %v4421 = vpop.f32.mrf.mxu0
  %v4422 = vadd.f32 %v4348, %v4421
  %v4423 = vpop.f32.mrf.mxu0
  %v4424 = vadd.f32 %v4350, %v4423
  %4425 = vmatmul.bf16.gmra.mxu0 %v1804
  %v4426 = vpop.f32.mrf.mxu0
  %v4427 = vadd.f32 %v4353, %v4426
  %v4428 = vpop.f32.mrf.mxu0
  %v4429 = vadd.f32 %v4355, %v4428
  %4430 = vmatmul.bf16.gmra.mxu0 %v1829
  %v4431 = vpop.f32.mrf.mxu0
  %v4432 = vadd.f32 %v4358, %v4431
  %v4433 = vpop.f32.mrf.mxu0
  %v4434 = vadd.f32 %v4360, %v4433
  %4435 = vmatmul.bf16.gmra.mxu0 %v1854
  %v4436 = vpop.f32.mrf.mxu0
  %v4437 = vadd.f32 %v4363, %v4436
  %v4438 = vpop.f32.mrf.mxu0
  %v4439 = vadd.f32 %v4365, %v4438
  %4440 = vmatmul.bf16.gmra.mxu0 %v1879
  %v4441 = vpop.f32.mrf.mxu0
  %v4442 = vadd.f32 %v4368, %v4441
  %v4443 = vpop.f32.mrf.mxu0
  %v4444 = vadd.f32 %v4370, %v4443
  %4445 = vmatmul.bf16.gmra.mxu0 %v1904
  %v4446 = vpop.f32.mrf.mxu0
  %v4447 = vadd.f32 %v4373, %v4446
  %v4448 = vpop.f32.mrf.mxu0
  %v4449 = vadd.f32 %v4375, %v4448
  %4450 = vmatmul.bf16.gmra.mxu0 %v1929
  %v4451 = vpop.f32.mrf.mxu0
  %v4452 = vadd.f32 %v4378, %v4451
  %v4453 = vpop.f32.mrf.mxu0
  %v4454 = vadd.f32 %v4380, %v4453
  %4455 = vmatmul.bf16.gmra.mxu0 %v1954
  %v4456 = vpop.f32.mrf.mxu0
  %v4457 = vadd.f32 %v4383, %v4456
  %v4458 = vpop.f32.mrf.mxu0
  %v4459 = vadd.f32 %v4385, %v4458
  %4460 = vmatmul.bf16.gmra.mxu0 %v1979
  %v4461 = vpop.f32.mrf.mxu0
  %v4462 = vadd.f32 %v4388, %v4461
  %v4463 = vpop.f32.mrf.mxu0
  %v4464 = vadd.f32 %v4390, %v4463
  %4465 = vmatmul.bf16.gmra.mxu0 %v2004
  %v4466 = vpop.f32.mrf.mxu0
  %v4467 = vadd.f32 %v4393, %v4466
  %v4468 = vpop.f32.mrf.mxu0
  %v4469 = vadd.f32 %v4395, %v4468
  %4470 = vmatmul.bf16.gmra.mxu0 %v2029
  %v4471 = vpop.f32.mrf.mxu0
  %v4472 = vadd.f32 %v4398, %v4471
  %v4473 = vpop.f32.mrf.mxu0
  %v4474 = vadd.f32 %v4400, %v4473
  %4475 = vmatmul.bf16.gmra.mxu0 %v2054
  %v4476 = vpop.f32.mrf.mxu0
  %v4477 = vadd.f32 %v4403, %v4476
  %v4478 = vpop.f32.mrf.mxu0
  %v4479 = vadd.f32 %v4405, %v4478
  %4480 = vdwg.mxu0
  %4481 = vmatpush.bf16.msra.mxu0 %v3296
  %4482 = vmatpush.bf16.msra.mxu0 %v3295
  %4483 = vmatpush.bf16.msra.mxu0 %v3294
  %4484 = vmatpush.bf16.msra.mxu0 %v3293
  %4485 = vmatpush.bf16.msra.mxu0 %v3292
  %4486 = vmatpush.bf16.msra.mxu0 %v3291
  %4487 = vmatpush.bf16.msra.mxu0 %v3290
  %4488 = vmatpush.bf16.msra.mxu0 %v3289
  %4489 = vmatmul.bf16.gmra.mxu0 %v1755
  %v4490 = vpop.f32.mrf.mxu0
  %v4491 = vadd.f32 %v4417, %v4490
  %v4492 = vpop.f32.mrf.mxu0
  %v4493 = vadd.f32 %v4419, %v4492
  %4494 = vmatmul.bf16.gmra.mxu0 %v1780
  %v4495 = vpop.f32.mrf.mxu0
  %v4496 = vadd.f32 %v4422, %v4495
  %v4497 = vpop.f32.mrf.mxu0
  %v4498 = vadd.f32 %v4424, %v4497
  %4499 = vmatmul.bf16.gmra.mxu0 %v1805
  %v4500 = vpop.f32.mrf.mxu0
  %v4501 = vadd.f32 %v4427, %v4500
  %v4502 = vpop.f32.mrf.mxu0
  %v4503 = vadd.f32 %v4429, %v4502
  %4504 = vmatmul.bf16.gmra.mxu0 %v1830
  %v4505 = vpop.f32.mrf.mxu0
  %v4506 = vadd.f32 %v4432, %v4505
  %v4507 = vpop.f32.mrf.mxu0
  %v4508 = vadd.f32 %v4434, %v4507
  %4509 = vmatmul.bf16.gmra.mxu0 %v1855
  %v4510 = vpop.f32.mrf.mxu0
  %v4511 = vadd.f32 %v4437, %v4510
  %v4512 = vpop.f32.mrf.mxu0
  %v4513 = vadd.f32 %v4439, %v4512
  %4514 = vmatmul.bf16.gmra.mxu0 %v1880
  %v4515 = vpop.f32.mrf.mxu0
  %v4516 = vadd.f32 %v4442, %v4515
  %v4517 = vpop.f32.mrf.mxu0
  %v4518 = vadd.f32 %v4444, %v4517
  %4519 = vmatmul.bf16.gmra.mxu0 %v1905
  %v4520 = vpop.f32.mrf.mxu0
  %v4521 = vadd.f32 %v4447, %v4520
  %v4522 = vpop.f32.mrf.mxu0
  %v4523 = vadd.f32 %v4449, %v4522
  %4524 = vmatmul.bf16.gmra.mxu0 %v1930
  %v4525 = vpop.f32.mrf.mxu0
  %v4526 = vadd.f32 %v4452, %v4525
  %v4527 = vpop.f32.mrf.mxu0
  %v4528 = vadd.f32 %v4454, %v4527
  %4529 = vmatmul.bf16.gmra.mxu0 %v1955
  %v4530 = vpop.f32.mrf.mxu0
  %v4531 = vadd.f32 %v4457, %v4530
  %v4532 = vpop.f32.mrf.mxu0
  %v4533 = vadd.f32 %v4459, %v4532
  %4534 = vmatmul.bf16.gmra.mxu0 %v1980
  %v4535 = vpop.f32.mrf.mxu0
  %v4536 = vadd.f32 %v4462, %v4535
  %v4537 = vpop.f32.mrf.mxu0
  %v4538 = vadd.f32 %v4464, %v4537
  %4539 = vmatmul.bf16.gmra.mxu0 %v2005
  %v4540 = vpop.f32.mrf.mxu0
  %v4541 = vadd.f32 %v4467, %v4540
  %v4542 = vpop.f32.mrf.mxu0
  %v4543 = vadd.f32 %v4469, %v4542
  %4544 = vmatmul.bf16.gmra.mxu0 %v2030
  %v4545 = vpop.f32.mrf.mxu0
  %v4546 = vadd.f32 %v4472, %v4545
  %v4547 = vpop.f32.mrf.mxu0
  %v4548 = vadd.f32 %v4474, %v4547
  %4549 = vmatmul.bf16.gmra.mxu0 %v2055
  %v4550 = vpop.f32.mrf.mxu0
  %v4551 = vadd.f32 %v4477, %v4550
  %v4552 = vpop.f32.mrf.mxu0
  %v4553 = vadd.f32 %v4479, %v4552
  %4554 = vdwg.mxu0
  %4555 = vmatpush.bf16.msra.mxu0 %v3304
  %4556 = vmatpush.bf16.msra.mxu0 %v3303
  %4557 = vmatpush.bf16.msra.mxu0 %v3302
  %4558 = vmatpush.bf16.msra.mxu0 %v3301
  %4559 = vmatpush.bf16.msra.mxu0 %v3300
  %4560 = vmatpush.bf16.msra.mxu0 %v3299
  %4561 = vmatpush.bf16.msra.mxu0 %v3298
  %4562 = vmatpush.bf16.msra.mxu0 %v3297
  %4563 = vmatmul.bf16.gmra.mxu0 %v1756
  %v4564 = vpop.f32.mrf.mxu0
  %v4565 = vadd.f32 %v4491, %v4564
  %v4566 = vpop.f32.mrf.mxu0
  %v4567 = vadd.f32 %v4493, %v4566
  %4568 = vmatmul.bf16.gmra.mxu0 %v1781
  %v4569 = vpop.f32.mrf.mxu0
  %v4570 = vadd.f32 %v4496, %v4569
  %v4571 = vpop.f32.mrf.mxu0
  %v4572 = vadd.f32 %v4498, %v4571
  %4573 = vmatmul.bf16.gmra.mxu0 %v1806
  %v4574 = vpop.f32.mrf.mxu0
  %v4575 = vadd.f32 %v4501, %v4574
  %v4576 = vpop.f32.mrf.mxu0
  %v4577 = vadd.f32 %v4503, %v4576
  %4578 = vmatmul.bf16.gmra.mxu0 %v1831
  %v4579 = vpop.f32.mrf.mxu0
  %v4580 = vadd.f32 %v4506, %v4579
  %v4581 = vpop.f32.mrf.mxu0
  %v4582 = vadd.f32 %v4508, %v4581
  %4583 = vmatmul.bf16.gmra.mxu0 %v1856
  %v4584 = vpop.f32.mrf.mxu0
  %v4585 = vadd.f32 %v4511, %v4584
  %v4586 = vpop.f32.mrf.mxu0
  %v4587 = vadd.f32 %v4513, %v4586
  %4588 = vmatmul.bf16.gmra.mxu0 %v1881
  %v4589 = vpop.f32.mrf.mxu0
  %v4590 = vadd.f32 %v4516, %v4589
  %v4591 = vpop.f32.mrf.mxu0
  %v4592 = vadd.f32 %v4518, %v4591
  %4593 = vmatmul.bf16.gmra.mxu0 %v1906
  %v4594 = vpop.f32.mrf.mxu0
  %v4595 = vadd.f32 %v4521, %v4594
  %v4596 = vpop.f32.mrf.mxu0
  %v4597 = vadd.f32 %v4523, %v4596
  %4598 = vmatmul.bf16.gmra.mxu0 %v1931
  %v4599 = vpop.f32.mrf.mxu0
  %v4600 = vadd.f32 %v4526, %v4599
  %v4601 = vpop.f32.mrf.mxu0
  %v4602 = vadd.f32 %v4528, %v4601
  %4603 = vmatmul.bf16.gmra.mxu0 %v1956
  %v4604 = vpop.f32.mrf.mxu0
  %v4605 = vadd.f32 %v4531, %v4604
  %v4606 = vpop.f32.mrf.mxu0
  %v4607 = vadd.f32 %v4533, %v4606
  %4608 = vmatmul.bf16.gmra.mxu0 %v1981
  %v4609 = vpop.f32.mrf.mxu0
  %v4610 = vadd.f32 %v4536, %v4609
  %v4611 = vpop.f32.mrf.mxu0
  %v4612 = vadd.f32 %v4538, %v4611
  %4613 = vmatmul.bf16.gmra.mxu0 %v2006
  %v4614 = vpop.f32.mrf.mxu0
  %v4615 = vadd.f32 %v4541, %v4614
  %v4616 = vpop.f32.mrf.mxu0
  %v4617 = vadd.f32 %v4543, %v4616
  %4618 = vmatmul.bf16.gmra.mxu0 %v2031
  %v4619 = vpop.f32.mrf.mxu0
  %v4620 = vadd.f32 %v4546, %v4619
  %v4621 = vpop.f32.mrf.mxu0
  %v4622 = vadd.f32 %v4548, %v4621
  %4623 = vmatmul.bf16.gmra.mxu0 %v2056
  %v4624 = vpop.f32.mrf.mxu0
  %v4625 = vadd.f32 %v4551, %v4624
  %v4626 = vpop.f32.mrf.mxu0
  %v4627 = vadd.f32 %v4553, %v4626
  %4628 = vdwg.mxu0
  %4629 = vmatpush.bf16.msra.mxu0 %v3312
  %4630 = vmatpush.bf16.msra.mxu0 %v3311
  %4631 = vmatpush.bf16.msra.mxu0 %v3310
  %4632 = vmatpush.bf16.msra.mxu0 %v3309
  %4633 = vmatpush.bf16.msra.mxu0 %v3308
  %4634 = vmatpush.bf16.msra.mxu0 %v3307
  %4635 = vmatpush.bf16.msra.mxu0 %v3306
  %4636 = vmatpush.bf16.msra.mxu0 %v3305
  %4637 = vmatmul.bf16.gmra.mxu0 %v1757
  %v4638 = vpop.f32.mrf.mxu0
  %v4639 = vadd.f32 %v4565, %v4638
  %v4640 = vpop.f32.mrf.mxu0
  %v4641 = vadd.f32 %v4567, %v4640
  %4642 = vmatmul.bf16.gmra.mxu0 %v1782
  %v4643 = vpop.f32.mrf.mxu0
  %v4644 = vadd.f32 %v4570, %v4643
  %v4645 = vpop.f32.mrf.mxu0
  %v4646 = vadd.f32 %v4572, %v4645
  %4647 = vmatmul.bf16.gmra.mxu0 %v1807
  %v4648 = vpop.f32.mrf.mxu0
  %v4649 = vadd.f32 %v4575, %v4648
  %v4650 = vpop.f32.mrf.mxu0
  %v4651 = vadd.f32 %v4577, %v4650
  %4652 = vmatmul.bf16.gmra.mxu0 %v1832
  %v4653 = vpop.f32.mrf.mxu0
  %v4654 = vadd.f32 %v4580, %v4653
  %v4655 = vpop.f32.mrf.mxu0
  %v4656 = vadd.f32 %v4582, %v4655
  %4657 = vmatmul.bf16.gmra.mxu0 %v1857
  %v4658 = vpop.f32.mrf.mxu0
  %v4659 = vadd.f32 %v4585, %v4658
  %v4660 = vpop.f32.mrf.mxu0
  %v4661 = vadd.f32 %v4587, %v4660
  %4662 = vmatmul.bf16.gmra.mxu0 %v1882
  %v4663 = vpop.f32.mrf.mxu0
  %v4664 = vadd.f32 %v4590, %v4663
  %v4665 = vpop.f32.mrf.mxu0
  %v4666 = vadd.f32 %v4592, %v4665
  %4667 = vmatmul.bf16.gmra.mxu0 %v1907
  %v4668 = vpop.f32.mrf.mxu0
  %v4669 = vadd.f32 %v4595, %v4668
  %v4670 = vpop.f32.mrf.mxu0
  %v4671 = vadd.f32 %v4597, %v4670
  %4672 = vmatmul.bf16.gmra.mxu0 %v1932
  %v4673 = vpop.f32.mrf.mxu0
  %v4674 = vadd.f32 %v4600, %v4673
  %v4675 = vpop.f32.mrf.mxu0
  %v4676 = vadd.f32 %v4602, %v4675
  %4677 = vmatmul.bf16.gmra.mxu0 %v1957
  %v4678 = vpop.f32.mrf.mxu0
  %v4679 = vadd.f32 %v4605, %v4678
  %v4680 = vpop.f32.mrf.mxu0
  %v4681 = vadd.f32 %v4607, %v4680
  %4682 = vmatmul.bf16.gmra.mxu0 %v1982
  %v4683 = vpop.f32.mrf.mxu0
  %v4684 = vadd.f32 %v4610, %v4683
  %v4685 = vpop.f32.mrf.mxu0
  %v4686 = vadd.f32 %v4612, %v4685
  %4687 = vmatmul.bf16.gmra.mxu0 %v2007
  %v4688 = vpop.f32.mrf.mxu0
  %v4689 = vadd.f32 %v4615, %v4688
  %v4690 = vpop.f32.mrf.mxu0
  %v4691 = vadd.f32 %v4617, %v4690
  %4692 = vmatmul.bf16.gmra.mxu0 %v2032
  %v4693 = vpop.f32.mrf.mxu0
  %v4694 = vadd.f32 %v4620, %v4693
  %v4695 = vpop.f32.mrf.mxu0
  %v4696 = vadd.f32 %v4622, %v4695
  %4697 = vmatmul.bf16.gmra.mxu0 %v2057
  %v4698 = vpop.f32.mrf.mxu0
  %v4699 = vadd.f32 %v4625, %v4698
  %v4700 = vpop.f32.mrf.mxu0
  %v4701 = vadd.f32 %v4627, %v4700
  %4702 = vdwg.mxu0
  %4703 = vmatpush.bf16.msra.mxu0 %v3320
  %4704 = vmatpush.bf16.msra.mxu0 %v3319
  %4705 = vmatpush.bf16.msra.mxu0 %v3318
  %4706 = vmatpush.bf16.msra.mxu0 %v3317
  %4707 = vmatpush.bf16.msra.mxu0 %v3316
  %4708 = vmatpush.bf16.msra.mxu0 %v3315
  %4709 = vmatpush.bf16.msra.mxu0 %v3314
  %4710 = vmatpush.bf16.msra.mxu0 %v3313
  %4711 = vmatmul.bf16.gmra.mxu0 %v1758
  %v4712 = vpop.f32.mrf.mxu0
  %v4713 = vadd.f32 %v4639, %v4712
  %v4714 = vpop.f32.mrf.mxu0
  %v4715 = vadd.f32 %v4641, %v4714
  %4716 = vmatmul.bf16.gmra.mxu0 %v1783
  %v4717 = vpop.f32.mrf.mxu0
  %v4718 = vadd.f32 %v4644, %v4717
  %v4719 = vpop.f32.mrf.mxu0
  %v4720 = vadd.f32 %v4646, %v4719
  %4721 = vmatmul.bf16.gmra.mxu0 %v1808
  %v4722 = vpop.f32.mrf.mxu0
  %v4723 = vadd.f32 %v4649, %v4722
  %v4724 = vpop.f32.mrf.mxu0
  %v4725 = vadd.f32 %v4651, %v4724
  %4726 = vmatmul.bf16.gmra.mxu0 %v1833
  %v4727 = vpop.f32.mrf.mxu0
  %v4728 = vadd.f32 %v4654, %v4727
  %v4729 = vpop.f32.mrf.mxu0
  %v4730 = vadd.f32 %v4656, %v4729
  %4731 = vmatmul.bf16.gmra.mxu0 %v1858
  %v4732 = vpop.f32.mrf.mxu0
  %v4733 = vadd.f32 %v4659, %v4732
  %v4734 = vpop.f32.mrf.mxu0
  %v4735 = vadd.f32 %v4661, %v4734
  %4736 = vmatmul.bf16.gmra.mxu0 %v1883
  %v4737 = vpop.f32.mrf.mxu0
  %v4738 = vadd.f32 %v4664, %v4737
  %v4739 = vpop.f32.mrf.mxu0
  %v4740 = vadd.f32 %v4666, %v4739
  %4741 = vmatmul.bf16.gmra.mxu0 %v1908
  %v4742 = vpop.f32.mrf.mxu0
  %v4743 = vadd.f32 %v4669, %v4742
  %v4744 = vpop.f32.mrf.mxu0
  %v4745 = vadd.f32 %v4671, %v4744
  %4746 = vmatmul.bf16.gmra.mxu0 %v1933
  %v4747 = vpop.f32.mrf.mxu0
  %v4748 = vadd.f32 %v4674, %v4747
  %v4749 = vpop.f32.mrf.mxu0
  %v4750 = vadd.f32 %v4676, %v4749
  %4751 = vmatmul.bf16.gmra.mxu0 %v1958
  %v4752 = vpop.f32.mrf.mxu0
  %v4753 = vadd.f32 %v4679, %v4752
  %v4754 = vpop.f32.mrf.mxu0
  %v4755 = vadd.f32 %v4681, %v4754
  %4756 = vmatmul.bf16.gmra.mxu0 %v1983
  %v4757 = vpop.f32.mrf.mxu0
  %v4758 = vadd.f32 %v4684, %v4757
  %v4759 = vpop.f32.mrf.mxu0
  %v4760 = vadd.f32 %v4686, %v4759
  %4761 = vmatmul.bf16.gmra.mxu0 %v2008
  %v4762 = vpop.f32.mrf.mxu0
  %v4763 = vadd.f32 %v4689, %v4762
  %v4764 = vpop.f32.mrf.mxu0
  %v4765 = vadd.f32 %v4691, %v4764
  %4766 = vmatmul.bf16.gmra.mxu0 %v2033
  %v4767 = vpop.f32.mrf.mxu0
  %v4768 = vadd.f32 %v4694, %v4767
  %v4769 = vpop.f32.mrf.mxu0
  %v4770 = vadd.f32 %v4696, %v4769
  %4771 = vmatmul.bf16.gmra.mxu0 %v2058
  %v4772 = vpop.f32.mrf.mxu0
  %v4773 = vadd.f32 %v4699, %v4772
  %v4774 = vpop.f32.mrf.mxu0
  %v4775 = vadd.f32 %v4701, %v4774
  %4776 = vdwg.mxu0
  %4777 = vmatpush.bf16.msra.mxu0 %v3328
  %4778 = vmatpush.bf16.msra.mxu0 %v3327
  %4779 = vmatpush.bf16.msra.mxu0 %v3326
  %4780 = vmatpush.bf16.msra.mxu0 %v3325
  %4781 = vmatpush.bf16.msra.mxu0 %v3324
  %4782 = vmatpush.bf16.msra.mxu0 %v3323
  %4783 = vmatpush.bf16.msra.mxu0 %v3322
  %4784 = vmatpush.bf16.msra.mxu0 %v3321
  %4785 = vmatmul.bf16.gmra.mxu0 %v1759
  %v4786 = vpop.f32.mrf.mxu0
  %v4787 = vadd.f32 %v4713, %v4786
  %v4788 = vpop.f32.mrf.mxu0
  %v4789 = vadd.f32 %v4715, %v4788
  %4790 = vmatmul.bf16.gmra.mxu0 %v1784
  %v4791 = vpop.f32.mrf.mxu0
  %v4792 = vadd.f32 %v4718, %v4791
  %v4793 = vpop.f32.mrf.mxu0
  %v4794 = vadd.f32 %v4720, %v4793
  %4795 = vmatmul.bf16.gmra.mxu0 %v1809
  %v4796 = vpop.f32.mrf.mxu0
  %v4797 = vadd.f32 %v4723, %v4796
  %v4798 = vpop.f32.mrf.mxu0
  %v4799 = vadd.f32 %v4725, %v4798
  %4800 = vmatmul.bf16.gmra.mxu0 %v1834
  %v4801 = vpop.f32.mrf.mxu0
  %v4802 = vadd.f32 %v4728, %v4801
  %v4803 = vpop.f32.mrf.mxu0
  %v4804 = vadd.f32 %v4730, %v4803
  %4805 = vmatmul.bf16.gmra.mxu0 %v1859
  %v4806 = vpop.f32.mrf.mxu0
  %v4807 = vadd.f32 %v4733, %v4806
  %v4808 = vpop.f32.mrf.mxu0
  %v4809 = vadd.f32 %v4735, %v4808
  %4810 = vmatmul.bf16.gmra.mxu0 %v1884
  %v4811 = vpop.f32.mrf.mxu0
  %v4812 = vadd.f32 %v4738, %v4811
  %v4813 = vpop.f32.mrf.mxu0
  %v4814 = vadd.f32 %v4740, %v4813
  %4815 = vmatmul.bf16.gmra.mxu0 %v1909
  %v4816 = vpop.f32.mrf.mxu0
  %v4817 = vadd.f32 %v4743, %v4816
  %v4818 = vpop.f32.mrf.mxu0
  %v4819 = vadd.f32 %v4745, %v4818
  %4820 = vmatmul.bf16.gmra.mxu0 %v1934
  %v4821 = vpop.f32.mrf.mxu0
  %v4822 = vadd.f32 %v4748, %v4821
  %v4823 = vpop.f32.mrf.mxu0
  %v4824 = vadd.f32 %v4750, %v4823
  %4825 = vmatmul.bf16.gmra.mxu0 %v1959
  %v4826 = vpop.f32.mrf.mxu0
  %v4827 = vadd.f32 %v4753, %v4826
  %v4828 = vpop.f32.mrf.mxu0
  %v4829 = vadd.f32 %v4755, %v4828
  %4830 = vmatmul.bf16.gmra.mxu0 %v1984
  %v4831 = vpop.f32.mrf.mxu0
  %v4832 = vadd.f32 %v4758, %v4831
  %v4833 = vpop.f32.mrf.mxu0
  %v4834 = vadd.f32 %v4760, %v4833
  %4835 = vmatmul.bf16.gmra.mxu0 %v2009
  %v4836 = vpop.f32.mrf.mxu0
  %v4837 = vadd.f32 %v4763, %v4836
  %v4838 = vpop.f32.mrf.mxu0
  %v4839 = vadd.f32 %v4765, %v4838
  %4840 = vmatmul.bf16.gmra.mxu0 %v2034
  %v4841 = vpop.f32.mrf.mxu0
  %v4842 = vadd.f32 %v4768, %v4841
  %v4843 = vpop.f32.mrf.mxu0
  %v4844 = vadd.f32 %v4770, %v4843
  %4845 = vmatmul.bf16.gmra.mxu0 %v2059
  %v4846 = vpop.f32.mrf.mxu0
  %v4847 = vadd.f32 %v4773, %v4846
  %v4848 = vpop.f32.mrf.mxu0
  %v4849 = vadd.f32 %v4775, %v4848
  %4850 = vdwg.mxu0
  %4851 = vmatpush.bf16.msra.mxu0 %v3336
  %4852 = vmatpush.bf16.msra.mxu0 %v3335
  %4853 = vmatpush.bf16.msra.mxu0 %v3334
  %4854 = vmatpush.bf16.msra.mxu0 %v3333
  %4855 = vmatpush.bf16.msra.mxu0 %v3332
  %4856 = vmatpush.bf16.msra.mxu0 %v3331
  %4857 = vmatpush.bf16.msra.mxu0 %v3330
  %4858 = vmatpush.bf16.msra.mxu0 %v3329
  %4859 = vmatmul.bf16.gmra.mxu0 %v1760
  %v4860 = vpop.f32.mrf.mxu0
  %v4861 = vadd.f32 %v4787, %v4860
  %v4862 = vpop.f32.mrf.mxu0
  %v4863 = vadd.f32 %v4789, %v4862
  %4864 = vmatmul.bf16.gmra.mxu0 %v1785
  %v4865 = vpop.f32.mrf.mxu0
  %v4866 = vadd.f32 %v4792, %v4865
  %v4867 = vpop.f32.mrf.mxu0
  %v4868 = vadd.f32 %v4794, %v4867
  %4869 = vmatmul.bf16.gmra.mxu0 %v1810
  %v4870 = vpop.f32.mrf.mxu0
  %v4871 = vadd.f32 %v4797, %v4870
  %v4872 = vpop.f32.mrf.mxu0
  %v4873 = vadd.f32 %v4799, %v4872
  %4874 = vmatmul.bf16.gmra.mxu0 %v1835
  %v4875 = vpop.f32.mrf.mxu0
  %v4876 = vadd.f32 %v4802, %v4875
  %v4877 = vpop.f32.mrf.mxu0
  %v4878 = vadd.f32 %v4804, %v4877
  %4879 = vmatmul.bf16.gmra.mxu0 %v1860
  %v4880 = vpop.f32.mrf.mxu0
  %v4881 = vadd.f32 %v4807, %v4880
  %v4882 = vpop.f32.mrf.mxu0
  %v4883 = vadd.f32 %v4809, %v4882
  %4884 = vmatmul.bf16.gmra.mxu0 %v1885
  %v4885 = vpop.f32.mrf.mxu0
  %v4886 = vadd.f32 %v4812, %v4885
  %v4887 = vpop.f32.mrf.mxu0
  %v4888 = vadd.f32 %v4814, %v4887
  %4889 = vmatmul.bf16.gmra.mxu0 %v1910
  %v4890 = vpop.f32.mrf.mxu0
  %v4891 = vadd.f32 %v4817, %v4890
  %v4892 = vpop.f32.mrf.mxu0
  %v4893 = vadd.f32 %v4819, %v4892
  %4894 = vmatmul.bf16.gmra.mxu0 %v1935
  %v4895 = vpop.f32.mrf.mxu0
  %v4896 = vadd.f32 %v4822, %v4895
  %v4897 = vpop.f32.mrf.mxu0
  %v4898 = vadd.f32 %v4824, %v4897
  %4899 = vmatmul.bf16.gmra.mxu0 %v1960
  %v4900 = vpop.f32.mrf.mxu0
  %v4901 = vadd.f32 %v4827, %v4900
  %v4902 = vpop.f32.mrf.mxu0
  %v4903 = vadd.f32 %v4829, %v4902
  %4904 = vmatmul.bf16.gmra.mxu0 %v1985
  %v4905 = vpop.f32.mrf.mxu0
  %v4906 = vadd.f32 %v4832, %v4905
  %v4907 = vpop.f32.mrf.mxu0
  %v4908 = vadd.f32 %v4834, %v4907
  %4909 = vmatmul.bf16.gmra.mxu0 %v2010
  %v4910 = vpop.f32.mrf.mxu0
  %v4911 = vadd.f32 %v4837, %v4910
  %v4912 = vpop.f32.mrf.mxu0
  %v4913 = vadd.f32 %v4839, %v4912
  %4914 = vmatmul.bf16.gmra.mxu0 %v2035
  %v4915 = vpop.f32.mrf.mxu0
  %v4916 = vadd.f32 %v4842, %v4915
  %v4917 = vpop.f32.mrf.mxu0
  %v4918 = vadd.f32 %v4844, %v4917
  %4919 = vmatmul.bf16.gmra.mxu0 %v2060
  %v4920 = vpop.f32.mrf.mxu0
  %v4921 = vadd.f32 %v4847, %v4920
  %v4922 = vpop.f32.mrf.mxu0
  %v4923 = vadd.f32 %v4849, %v4922
  %4924 = vdwg.mxu0
  %4925 = vmatpush.bf16.msra.mxu0 %v3344
  %4926 = vmatpush.bf16.msra.mxu0 %v3343
  %4927 = vmatpush.bf16.msra.mxu0 %v3342
  %4928 = vmatpush.bf16.msra.mxu0 %v3341
  %4929 = vmatpush.bf16.msra.mxu0 %v3340
  %4930 = vmatpush.bf16.msra.mxu0 %v3339
  %4931 = vmatpush.bf16.msra.mxu0 %v3338
  %4932 = vmatpush.bf16.msra.mxu0 %v3337
  %4933 = vmatmul.bf16.gmra.mxu0 %v1761
  %v4934 = vpop.f32.mrf.mxu0
  %v4935 = vadd.f32 %v4861, %v4934
  %v4936 = vpop.f32.mrf.mxu0
  %v4937 = vadd.f32 %v4863, %v4936
  %4938 = vmatmul.bf16.gmra.mxu0 %v1786
  %v4939 = vpop.f32.mrf.mxu0
  %v4940 = vadd.f32 %v4866, %v4939
  %v4941 = vpop.f32.mrf.mxu0
  %v4942 = vadd.f32 %v4868, %v4941
  %4943 = vmatmul.bf16.gmra.mxu0 %v1811
  %v4944 = vpop.f32.mrf.mxu0
  %v4945 = vadd.f32 %v4871, %v4944
  %v4946 = vpop.f32.mrf.mxu0
  %v4947 = vadd.f32 %v4873, %v4946
  %4948 = vmatmul.bf16.gmra.mxu0 %v1836
  %v4949 = vpop.f32.mrf.mxu0
  %v4950 = vadd.f32 %v4876, %v4949
  %v4951 = vpop.f32.mrf.mxu0
  %v4952 = vadd.f32 %v4878, %v4951
  %4953 = vmatmul.bf16.gmra.mxu0 %v1861
  %v4954 = vpop.f32.mrf.mxu0
  %v4955 = vadd.f32 %v4881, %v4954
  %v4956 = vpop.f32.mrf.mxu0
  %v4957 = vadd.f32 %v4883, %v4956
  %4958 = vmatmul.bf16.gmra.mxu0 %v1886
  %v4959 = vpop.f32.mrf.mxu0
  %v4960 = vadd.f32 %v4886, %v4959
  %v4961 = vpop.f32.mrf.mxu0
  %v4962 = vadd.f32 %v4888, %v4961
  %4963 = vmatmul.bf16.gmra.mxu0 %v1911
  %v4964 = vpop.f32.mrf.mxu0
  %v4965 = vadd.f32 %v4891, %v4964
  %v4966 = vpop.f32.mrf.mxu0
  %v4967 = vadd.f32 %v4893, %v4966
  %4968 = vmatmul.bf16.gmra.mxu0 %v1936
  %v4969 = vpop.f32.mrf.mxu0
  %v4970 = vadd.f32 %v4896, %v4969
  %v4971 = vpop.f32.mrf.mxu0
  %v4972 = vadd.f32 %v4898, %v4971
  %4973 = vmatmul.bf16.gmra.mxu0 %v1961
  %v4974 = vpop.f32.mrf.mxu0
  %v4975 = vadd.f32 %v4901, %v4974
  %v4976 = vpop.f32.mrf.mxu0
  %v4977 = vadd.f32 %v4903, %v4976
  %4978 = vmatmul.bf16.gmra.mxu0 %v1986
  %v4979 = vpop.f32.mrf.mxu0
  %v4980 = vadd.f32 %v4906, %v4979
  %v4981 = vpop.f32.mrf.mxu0
  %v4982 = vadd.f32 %v4908, %v4981
  %4983 = vmatmul.bf16.gmra.mxu0 %v2011
  %v4984 = vpop.f32.mrf.mxu0
  %v4985 = vadd.f32 %v4911, %v4984
  %v4986 = vpop.f32.mrf.mxu0
  %v4987 = vadd.f32 %v4913, %v4986
  %4988 = vmatmul.bf16.gmra.mxu0 %v2036
  %v4989 = vpop.f32.mrf.mxu0
  %v4990 = vadd.f32 %v4916, %v4989
  %v4991 = vpop.f32.mrf.mxu0
  %v4992 = vadd.f32 %v4918, %v4991
  %4993 = vmatmul.bf16.gmra.mxu0 %v2061
  %v4994 = vpop.f32.mrf.mxu0
  %v4995 = vadd.f32 %v4921, %v4994
  %v4996 = vpop.f32.mrf.mxu0
  %v4997 = vadd.f32 %v4923, %v4996
  %4998 = vdwg.mxu0
  %4999 = vmatpush.bf16.msra.mxu0 %v3352
  %5000 = vmatpush.bf16.msra.mxu0 %v3351
  %5001 = vmatpush.bf16.msra.mxu0 %v3350
  %5002 = vmatpush.bf16.msra.mxu0 %v3349
  %5003 = vmatpush.bf16.msra.mxu0 %v3348
  %5004 = vmatpush.bf16.msra.mxu0 %v3347
  %5005 = vmatpush.bf16.msra.mxu0 %v3346
  %5006 = vmatpush.bf16.msra.mxu0 %v3345
  %5007 = vmatmul.bf16.gmra.mxu0 %v1762
  %v5008 = vpop.f32.mrf.mxu0
  %v5009 = vadd.f32 %v4935, %v5008
  %v5010 = vpop.f32.mrf.mxu0
  %v5011 = vadd.f32 %v4937, %v5010
  %5012 = vmatmul.bf16.gmra.mxu0 %v1787
  %v5013 = vpop.f32.mrf.mxu0
  %v5014 = vadd.f32 %v4940, %v5013
  %v5015 = vpop.f32.mrf.mxu0
  %v5016 = vadd.f32 %v4942, %v5015
  %5017 = vmatmul.bf16.gmra.mxu0 %v1812
  %v5018 = vpop.f32.mrf.mxu0
  %v5019 = vadd.f32 %v4945, %v5018
  %v5020 = vpop.f32.mrf.mxu0
  %v5021 = vadd.f32 %v4947, %v5020
  %5022 = vmatmul.bf16.gmra.mxu0 %v1837
  %v5023 = vpop.f32.mrf.mxu0
  %v5024 = vadd.f32 %v4950, %v5023
  %v5025 = vpop.f32.mrf.mxu0
  %v5026 = vadd.f32 %v4952, %v5025
  %5027 = vmatmul.bf16.gmra.mxu0 %v1862
  %v5028 = vpop.f32.mrf.mxu0
  %v5029 = vadd.f32 %v4955, %v5028
  %v5030 = vpop.f32.mrf.mxu0
  %v5031 = vadd.f32 %v4957, %v5030
  %5032 = vmatmul.bf16.gmra.mxu0 %v1887
  %v5033 = vpop.f32.mrf.mxu0
  %v5034 = vadd.f32 %v4960, %v5033
  %v5035 = vpop.f32.mrf.mxu0
  %v5036 = vadd.f32 %v4962, %v5035
  %5037 = vmatmul.bf16.gmra.mxu0 %v1912
  %v5038 = vpop.f32.mrf.mxu0
  %v5039 = vadd.f32 %v4965, %v5038
  %v5040 = vpop.f32.mrf.mxu0
  %v5041 = vadd.f32 %v4967, %v5040
  %5042 = vmatmul.bf16.gmra.mxu0 %v1937
  %v5043 = vpop.f32.mrf.mxu0
  %v5044 = vadd.f32 %v4970, %v5043
  %v5045 = vpop.f32.mrf.mxu0
  %v5046 = vadd.f32 %v4972, %v5045
  %5047 = vmatmul.bf16.gmra.mxu0 %v1962
  %v5048 = vpop.f32.mrf.mxu0
  %v5049 = vadd.f32 %v4975, %v5048
  %v5050 = vpop.f32.mrf.mxu0
  %v5051 = vadd.f32 %v4977, %v5050
  %5052 = vmatmul.bf16.gmra.mxu0 %v1987
  %v5053 = vpop.f32.mrf.mxu0
  %v5054 = vadd.f32 %v4980, %v5053
  %v5055 = vpop.f32.mrf.mxu0
  %v5056 = vadd.f32 %v4982, %v5055
  %5057 = vmatmul.bf16.gmra.mxu0 %v2012
  %v5058 = vpop.f32.mrf.mxu0
  %v5059 = vadd.f32 %v4985, %v5058
  %v5060 = vpop.f32.mrf.mxu0
  %v5061 = vadd.f32 %v4987, %v5060
  %5062 = vmatmul.bf16.gmra.mxu0 %v2037
  %v5063 = vpop.f32.mrf.mxu0
  %v5064 = vadd.f32 %v4990, %v5063
  %v5065 = vpop.f32.mrf.mxu0
  %v5066 = vadd.f32 %v4992, %v5065
  %5067 = vmatmul.bf16.gmra.mxu0 %v2062
  %v5068 = vpop.f32.mrf.mxu0
  %v5069 = vadd.f32 %v4995, %v5068
  %v5070 = vpop.f32.mrf.mxu0
  %v5071 = vadd.f32 %v4997, %v5070
  %5072 = vdwg.mxu0
  %5073 = vmatpush.bf16.msra.mxu0 %v3360
  %5074 = vmatpush.bf16.msra.mxu0 %v3359
  %5075 = vmatpush.bf16.msra.mxu0 %v3358
  %5076 = vmatpush.bf16.msra.mxu0 %v3357
  %5077 = vmatpush.bf16.msra.mxu0 %v3356
  %5078 = vmatpush.bf16.msra.mxu0 %v3355
  %5079 = vmatpush.bf16.msra.mxu0 %v3354
  %5080 = vmatpush.bf16.msra.mxu0 %v3353
  %5081 = vmatmul.bf16.gmra.mxu0 %v1763
  %v5082 = vpop.f32.mrf.mxu0
  %v5083 = vadd.f32 %v5009, %v5082
  %v5084 = vpop.f32.mrf.mxu0
  %v5085 = vadd.f32 %v5011, %v5084
  %5086 = vmatmul.bf16.gmra.mxu0 %v1788
  %v5087 = vpop.f32.mrf.mxu0
  %v5088 = vadd.f32 %v5014, %v5087
  %v5089 = vpop.f32.mrf.mxu0
  %v5090 = vadd.f32 %v5016, %v5089
  %5091 = vmatmul.bf16.gmra.mxu0 %v1813
  %v5092 = vpop.f32.mrf.mxu0
  %v5093 = vadd.f32 %v5019, %v5092
  %v5094 = vpop.f32.mrf.mxu0
  %v5095 = vadd.f32 %v5021, %v5094
  %5096 = vmatmul.bf16.gmra.mxu0 %v1838
  %v5097 = vpop.f32.mrf.mxu0
  %v5098 = vadd.f32 %v5024, %v5097
  %v5099 = vpop.f32.mrf.mxu0
  %v5100 = vadd.f32 %v5026, %v5099
  %5101 = vmatmul.bf16.gmra.mxu0 %v1863
  %v5102 = vpop.f32.mrf.mxu0
  %v5103 = vadd.f32 %v5029, %v5102
  %v5104 = vpop.f32.mrf.mxu0
  %v5105 = vadd.f32 %v5031, %v5104
  %5106 = vmatmul.bf16.gmra.mxu0 %v1888
  %v5107 = vpop.f32.mrf.mxu0
  %v5108 = vadd.f32 %v5034, %v5107
  %v5109 = vpop.f32.mrf.mxu0
  %v5110 = vadd.f32 %v5036, %v5109
  %5111 = vmatmul.bf16.gmra.mxu0 %v1913
  %v5112 = vpop.f32.mrf.mxu0
  %v5113 = vadd.f32 %v5039, %v5112
  %v5114 = vpop.f32.mrf.mxu0
  %v5115 = vadd.f32 %v5041, %v5114
  %5116 = vmatmul.bf16.gmra.mxu0 %v1938
  %v5117 = vpop.f32.mrf.mxu0
  %v5118 = vadd.f32 %v5044, %v5117
  %v5119 = vpop.f32.mrf.mxu0
  %v5120 = vadd.f32 %v5046, %v5119
  %5121 = vmatmul.bf16.gmra.mxu0 %v1963
  %v5122 = vpop.f32.mrf.mxu0
  %v5123 = vadd.f32 %v5049, %v5122
  %v5124 = vpop.f32.mrf.mxu0
  %v5125 = vadd.f32 %v5051, %v5124
  %5126 = vmatmul.bf16.gmra.mxu0 %v1988
  %v5127 = vpop.f32.mrf.mxu0
  %v5128 = vadd.f32 %v5054, %v5127
  %v5129 = vpop.f32.mrf.mxu0
  %v5130 = vadd.f32 %v5056, %v5129
  %5131 = vmatmul.bf16.gmra.mxu0 %v2013
  %v5132 = vpop.f32.mrf.mxu0
  %v5133 = vadd.f32 %v5059, %v5132
  %v5134 = vpop.f32.mrf.mxu0
  %v5135 = vadd.f32 %v5061, %v5134
  %5136 = vmatmul.bf16.gmra.mxu0 %v2038
  %v5137 = vpop.f32.mrf.mxu0
  %v5138 = vadd.f32 %v5064, %v5137
  %v5139 = vpop.f32.mrf.mxu0
  %v5140 = vadd.f32 %v5066, %v5139
  %5141 = vmatmul.bf16.gmra.mxu0 %v2063
  %v5142 = vpop.f32.mrf.mxu0
  %v5143 = vadd.f32 %v5069, %v5142
  %v5144 = vpop.f32.mrf.mxu0
  %v5145 = vadd.f32 %v5071, %v5144
  %5146 = vdwg.mxu0
  %5147 = vmatpush.bf16.msra.mxu0 %v3368
  %5148 = vmatpush.bf16.msra.mxu0 %v3367
  %5149 = vmatpush.bf16.msra.mxu0 %v3366
  %5150 = vmatpush.bf16.msra.mxu0 %v3365
  %5151 = vmatpush.bf16.msra.mxu0 %v3364
  %5152 = vmatpush.bf16.msra.mxu0 %v3363
  %5153 = vmatpush.bf16.msra.mxu0 %v3362
  %5154 = vmatpush.bf16.msra.mxu0 %v3361
  %5155 = vmatmul.bf16.gmra.mxu0 %v1764
  %v5156 = vpop.f32.mrf.mxu0
  %v5157 = vadd.f32 %v5083, %v5156
  %v5158 = vpop.f32.mrf.mxu0
  %v5159 = vadd.f32 %v5085, %v5158
  %5160 = vmatmul.bf16.gmra.mxu0 %v1789
  %v5161 = vpop.f32.mrf.mxu0
  %v5162 = vadd.f32 %v5088, %v5161
  %v5163 = vpop.f32.mrf.mxu0
  %v5164 = vadd.f32 %v5090, %v5163
  %5165 = vmatmul.bf16.gmra.mxu0 %v1814
  %v5166 = vpop.f32.mrf.mxu0
  %v5167 = vadd.f32 %v5093, %v5166
  %v5168 = vpop.f32.mrf.mxu0
  %v5169 = vadd.f32 %v5095, %v5168
  %5170 = vmatmul.bf16.gmra.mxu0 %v1839
  %v5171 = vpop.f32.mrf.mxu0
  %v5172 = vadd.f32 %v5098, %v5171
  %v5173 = vpop.f32.mrf.mxu0
  %v5174 = vadd.f32 %v5100, %v5173
  %5175 = vmatmul.bf16.gmra.mxu0 %v1864
  %v5176 = vpop.f32.mrf.mxu0
  %v5177 = vadd.f32 %v5103, %v5176
  %v5178 = vpop.f32.mrf.mxu0
  %v5179 = vadd.f32 %v5105, %v5178
  %5180 = vmatmul.bf16.gmra.mxu0 %v1889
  %v5181 = vpop.f32.mrf.mxu0
  %v5182 = vadd.f32 %v5108, %v5181
  %v5183 = vpop.f32.mrf.mxu0
  %v5184 = vadd.f32 %v5110, %v5183
  %5185 = vmatmul.bf16.gmra.mxu0 %v1914
  %v5186 = vpop.f32.mrf.mxu0
  %v5187 = vadd.f32 %v5113, %v5186
  %v5188 = vpop.f32.mrf.mxu0
  %v5189 = vadd.f32 %v5115, %v5188
  %5190 = vmatmul.bf16.gmra.mxu0 %v1939
  %v5191 = vpop.f32.mrf.mxu0
  %v5192 = vadd.f32 %v5118, %v5191
  %v5193 = vpop.f32.mrf.mxu0
  %v5194 = vadd.f32 %v5120, %v5193
  %5195 = vmatmul.bf16.gmra.mxu0 %v1964
  %v5196 = vpop.f32.mrf.mxu0
  %v5197 = vadd.f32 %v5123, %v5196
  %v5198 = vpop.f32.mrf.mxu0
  %v5199 = vadd.f32 %v5125, %v5198
  %5200 = vmatmul.bf16.gmra.mxu0 %v1989
  %v5201 = vpop.f32.mrf.mxu0
  %v5202 = vadd.f32 %v5128, %v5201
  %v5203 = vpop.f32.mrf.mxu0
  %v5204 = vadd.f32 %v5130, %v5203
  %5205 = vmatmul.bf16.gmra.mxu0 %v2014
  %v5206 = vpop.f32.mrf.mxu0
  %v5207 = vadd.f32 %v5133, %v5206
  %v5208 = vpop.f32.mrf.mxu0
  %v5209 = vadd.f32 %v5135, %v5208
  %5210 = vmatmul.bf16.gmra.mxu0 %v2039
  %v5211 = vpop.f32.mrf.mxu0
  %v5212 = vadd.f32 %v5138, %v5211
  %v5213 = vpop.f32.mrf.mxu0
  %v5214 = vadd.f32 %v5140, %v5213
  %5215 = vmatmul.bf16.gmra.mxu0 %v2064
  %v5216 = vpop.f32.mrf.mxu0
  %v5217 = vadd.f32 %v5143, %v5216
  %v5218 = vpop.f32.mrf.mxu0
  %v5219 = vadd.f32 %v5145, %v5218
  %5220 = vdwg.mxu0
  %5221 = vmatpush.bf16.msra.mxu0 %v3376
  %5222 = vmatpush.bf16.msra.mxu0 %v3375
  %5223 = vmatpush.bf16.msra.mxu0 %v3374
  %5224 = vmatpush.bf16.msra.mxu0 %v3373
  %5225 = vmatpush.bf16.msra.mxu0 %v3372
  %5226 = vmatpush.bf16.msra.mxu0 %v3371
  %5227 = vmatpush.bf16.msra.mxu0 %v3370
  %5228 = vmatpush.bf16.msra.mxu0 %v3369
  %5229 = vmatmul.bf16.gmra.mxu0 %v1765
  %v5230 = vpop.f32.mrf.mxu0
  %v5231 = vadd.f32 %v5157, %v5230
  %v5232 = vpop.f32.mrf.mxu0
  %v5233 = vadd.f32 %v5159, %v5232
  %5234 = vmatmul.bf16.gmra.mxu0 %v1790
  %v5235 = vpop.f32.mrf.mxu0
  %v5236 = vadd.f32 %v5162, %v5235
  %v5237 = vpop.f32.mrf.mxu0
  %v5238 = vadd.f32 %v5164, %v5237
  %5239 = vmatmul.bf16.gmra.mxu0 %v1815
  %v5240 = vpop.f32.mrf.mxu0
  %v5241 = vadd.f32 %v5167, %v5240
  %v5242 = vpop.f32.mrf.mxu0
  %v5243 = vadd.f32 %v5169, %v5242
  %5244 = vmatmul.bf16.gmra.mxu0 %v1840
  %v5245 = vpop.f32.mrf.mxu0
  %v5246 = vadd.f32 %v5172, %v5245
  %v5247 = vpop.f32.mrf.mxu0
  %v5248 = vadd.f32 %v5174, %v5247
  %5249 = vmatmul.bf16.gmra.mxu0 %v1865
  %v5250 = vpop.f32.mrf.mxu0
  %v5251 = vadd.f32 %v5177, %v5250
  %v5252 = vpop.f32.mrf.mxu0
  %v5253 = vadd.f32 %v5179, %v5252
  %5254 = vmatmul.bf16.gmra.mxu0 %v1890
  %v5255 = vpop.f32.mrf.mxu0
  %v5256 = vadd.f32 %v5182, %v5255
  %v5257 = vpop.f32.mrf.mxu0
  %v5258 = vadd.f32 %v5184, %v5257
  %5259 = vmatmul.bf16.gmra.mxu0 %v1915
  %v5260 = vpop.f32.mrf.mxu0
  %v5261 = vadd.f32 %v5187, %v5260
  %v5262 = vpop.f32.mrf.mxu0
  %v5263 = vadd.f32 %v5189, %v5262
  %5264 = vmatmul.bf16.gmra.mxu0 %v1940
  %v5265 = vpop.f32.mrf.mxu0
  %v5266 = vadd.f32 %v5192, %v5265
  %v5267 = vpop.f32.mrf.mxu0
  %v5268 = vadd.f32 %v5194, %v5267
  %5269 = vmatmul.bf16.gmra.mxu0 %v1965
  %v5270 = vpop.f32.mrf.mxu0
  %v5271 = vadd.f32 %v5197, %v5270
  %v5272 = vpop.f32.mrf.mxu0
  %v5273 = vadd.f32 %v5199, %v5272
  %5274 = vmatmul.bf16.gmra.mxu0 %v1990
  %v5275 = vpop.f32.mrf.mxu0
  %v5276 = vadd.f32 %v5202, %v5275
  %v5277 = vpop.f32.mrf.mxu0
  %v5278 = vadd.f32 %v5204, %v5277
  %5279 = vmatmul.bf16.gmra.mxu0 %v2015
  %v5280 = vpop.f32.mrf.mxu0
  %v5281 = vadd.f32 %v5207, %v5280
  %v5282 = vpop.f32.mrf.mxu0
  %v5283 = vadd.f32 %v5209, %v5282
  %5284 = vmatmul.bf16.gmra.mxu0 %v2040
  %v5285 = vpop.f32.mrf.mxu0
  %v5286 = vadd.f32 %v5212, %v5285
  %v5287 = vpop.f32.mrf.mxu0
  %v5288 = vadd.f32 %v5214, %v5287
  %5289 = vmatmul.bf16.gmra.mxu0 %v2065
  %v5290 = vpop.f32.mrf.mxu0
  %v5291 = vadd.f32 %v5217, %v5290
  %v5292 = vpop.f32.mrf.mxu0
  %v5293 = vadd.f32 %v5219, %v5292
  %5294 = vdwg.mxu0
  %5295 = vmatpush.bf16.msra.mxu0 %v3384
  %5296 = vmatpush.bf16.msra.mxu0 %v3383
  %5297 = vmatpush.bf16.msra.mxu0 %v3382
  %5298 = vmatpush.bf16.msra.mxu0 %v3381
  %5299 = vmatpush.bf16.msra.mxu0 %v3380
  %5300 = vmatpush.bf16.msra.mxu0 %v3379
  %5301 = vmatpush.bf16.msra.mxu0 %v3378
  %5302 = vmatpush.bf16.msra.mxu0 %v3377
  %5303 = vmatmul.bf16.gmra.mxu0 %v1766
  %v5304 = vpop.f32.mrf.mxu0
  %v5305 = vadd.f32 %v5231, %v5304
  %v5306 = vpop.f32.mrf.mxu0
  %v5307 = vadd.f32 %v5233, %v5306
  %5308 = vmatmul.bf16.gmra.mxu0 %v1791
  %v5309 = vpop.f32.mrf.mxu0
  %v5310 = vadd.f32 %v5236, %v5309
  %v5311 = vpop.f32.mrf.mxu0
  %v5312 = vadd.f32 %v5238, %v5311
  %5313 = vmatmul.bf16.gmra.mxu0 %v1816
  %v5314 = vpop.f32.mrf.mxu0
  %v5315 = vadd.f32 %v5241, %v5314
  %v5316 = vpop.f32.mrf.mxu0
  %v5317 = vadd.f32 %v5243, %v5316
  %5318 = vmatmul.bf16.gmra.mxu0 %v1841
  %v5319 = vpop.f32.mrf.mxu0
  %v5320 = vadd.f32 %v5246, %v5319
  %v5321 = vpop.f32.mrf.mxu0
  %v5322 = vadd.f32 %v5248, %v5321
  %5323 = vmatmul.bf16.gmra.mxu0 %v1866
  %v5324 = vpop.f32.mrf.mxu0
  %v5325 = vadd.f32 %v5251, %v5324
  %v5326 = vpop.f32.mrf.mxu0
  %v5327 = vadd.f32 %v5253, %v5326
  %5328 = vmatmul.bf16.gmra.mxu0 %v1891
  %v5329 = vpop.f32.mrf.mxu0
  %v5330 = vadd.f32 %v5256, %v5329
  %v5331 = vpop.f32.mrf.mxu0
  %v5332 = vadd.f32 %v5258, %v5331
  %5333 = vmatmul.bf16.gmra.mxu0 %v1916
  %v5334 = vpop.f32.mrf.mxu0
  %v5335 = vadd.f32 %v5261, %v5334
  %v5336 = vpop.f32.mrf.mxu0
  %v5337 = vadd.f32 %v5263, %v5336
  %5338 = vmatmul.bf16.gmra.mxu0 %v1941
  %v5339 = vpop.f32.mrf.mxu0
  %v5340 = vadd.f32 %v5266, %v5339
  %v5341 = vpop.f32.mrf.mxu0
  %v5342 = vadd.f32 %v5268, %v5341
  %5343 = vmatmul.bf16.gmra.mxu0 %v1966
  %v5344 = vpop.f32.mrf.mxu0
  %v5345 = vadd.f32 %v5271, %v5344
  %v5346 = vpop.f32.mrf.mxu0
  %v5347 = vadd.f32 %v5273, %v5346
  %5348 = vmatmul.bf16.gmra.mxu0 %v1991
  %v5349 = vpop.f32.mrf.mxu0
  %v5350 = vadd.f32 %v5276, %v5349
  %v5351 = vpop.f32.mrf.mxu0
  %v5352 = vadd.f32 %v5278, %v5351
  %5353 = vmatmul.bf16.gmra.mxu0 %v2016
  %v5354 = vpop.f32.mrf.mxu0
  %v5355 = vadd.f32 %v5281, %v5354
  %v5356 = vpop.f32.mrf.mxu0
  %v5357 = vadd.f32 %v5283, %v5356
  %5358 = vmatmul.bf16.gmra.mxu0 %v2041
  %v5359 = vpop.f32.mrf.mxu0
  %v5360 = vadd.f32 %v5286, %v5359
  %v5361 = vpop.f32.mrf.mxu0
  %v5362 = vadd.f32 %v5288, %v5361
  %5363 = vmatmul.bf16.gmra.mxu0 %v2066
  %v5364 = vpop.f32.mrf.mxu0
  %v5365 = vadd.f32 %v5291, %v5364
  %v5366 = vpop.f32.mrf.mxu0
  %v5367 = vadd.f32 %v5293, %v5366
  %5368 = vdwg.mxu0
  %5369 = vmatpush.bf16.msra.mxu0 %v3392
  %5370 = vmatpush.bf16.msra.mxu0 %v3391
  %5371 = vmatpush.bf16.msra.mxu0 %v3390
  %5372 = vmatpush.bf16.msra.mxu0 %v3389
  %5373 = vmatpush.bf16.msra.mxu0 %v3388
  %5374 = vmatpush.bf16.msra.mxu0 %v3387
  %5375 = vmatpush.bf16.msra.mxu0 %v3386
  %5376 = vmatpush.bf16.msra.mxu0 %v3385
  %5377 = vmatmul.bf16.gmra.mxu0 %v1767
  %v5378 = vpop.f32.mrf.mxu0
  %v5379 = vadd.f32 %v5305, %v5378
  %v5380 = vpop.f32.mrf.mxu0
  %v5381 = vadd.f32 %v5307, %v5380
  %5382 = vmatmul.bf16.gmra.mxu0 %v1792
  %v5383 = vpop.f32.mrf.mxu0
  %v5384 = vadd.f32 %v5310, %v5383
  %v5385 = vpop.f32.mrf.mxu0
  %v5386 = vadd.f32 %v5312, %v5385
  %5387 = vmatmul.bf16.gmra.mxu0 %v1817
  %v5388 = vpop.f32.mrf.mxu0
  %v5389 = vadd.f32 %v5315, %v5388
  %v5390 = vpop.f32.mrf.mxu0
  %v5391 = vadd.f32 %v5317, %v5390
  %5392 = vmatmul.bf16.gmra.mxu0 %v1842
  %v5393 = vpop.f32.mrf.mxu0
  %v5394 = vadd.f32 %v5320, %v5393
  %v5395 = vpop.f32.mrf.mxu0
  %v5396 = vadd.f32 %v5322, %v5395
  %5397 = vmatmul.bf16.gmra.mxu0 %v1867
  %v5398 = vpop.f32.mrf.mxu0
  %v5399 = vadd.f32 %v5325, %v5398
  %v5400 = vpop.f32.mrf.mxu0
  %v5401 = vadd.f32 %v5327, %v5400
  %5402 = vmatmul.bf16.gmra.mxu0 %v1892
  %v5403 = vpop.f32.mrf.mxu0
  %v5404 = vadd.f32 %v5330, %v5403
  %v5405 = vpop.f32.mrf.mxu0
  %v5406 = vadd.f32 %v5332, %v5405
  %5407 = vmatmul.bf16.gmra.mxu0 %v1917
  %v5408 = vpop.f32.mrf.mxu0
  %v5409 = vadd.f32 %v5335, %v5408
  %v5410 = vpop.f32.mrf.mxu0
  %v5411 = vadd.f32 %v5337, %v5410
  %5412 = vmatmul.bf16.gmra.mxu0 %v1942
  %v5413 = vpop.f32.mrf.mxu0
  %v5414 = vadd.f32 %v5340, %v5413
  %v5415 = vpop.f32.mrf.mxu0
  %v5416 = vadd.f32 %v5342, %v5415
  %5417 = vmatmul.bf16.gmra.mxu0 %v1967
  %v5418 = vpop.f32.mrf.mxu0
  %v5419 = vadd.f32 %v5345, %v5418
  %v5420 = vpop.f32.mrf.mxu0
  %v5421 = vadd.f32 %v5347, %v5420
  %5422 = vmatmul.bf16.gmra.mxu0 %v1992
  %v5423 = vpop.f32.mrf.mxu0
  %v5424 = vadd.f32 %v5350, %v5423
  %v5425 = vpop.f32.mrf.mxu0
  %v5426 = vadd.f32 %v5352, %v5425
  %5427 = vmatmul.bf16.gmra.mxu0 %v2017
  %v5428 = vpop.f32.mrf.mxu0
  %v5429 = vadd.f32 %v5355, %v5428
  %v5430 = vpop.f32.mrf.mxu0
  %v5431 = vadd.f32 %v5357, %v5430
  %5432 = vmatmul.bf16.gmra.mxu0 %v2042
  %v5433 = vpop.f32.mrf.mxu0
  %v5434 = vadd.f32 %v5360, %v5433
  %v5435 = vpop.f32.mrf.mxu0
  %v5436 = vadd.f32 %v5362, %v5435
  %5437 = vmatmul.bf16.gmra.mxu0 %v2067
  %v5438 = vpop.f32.mrf.mxu0
  %v5439 = vadd.f32 %v5365, %v5438
  %v5440 = vpop.f32.mrf.mxu0
  %v5441 = vadd.f32 %v5367, %v5440
  %5442 = vdwg.mxu0
  %v5443 = vld [vmem:[%s2] sm:$0x1]
  %v5445 = vperm.slane %v5443, 0
  %v5447 = vmul.f32 %v5379, %v5445
  %v5448 = vmul.f32 %v5381, %v5445
  %v5449 = vmul.f32 %v5384, %v5445
  %v5450 = vmul.f32 %v5386, %v5445
  %v5451 = vmul.f32 %v5389, %v5445
  %v5452 = vmul.f32 %v5391, %v5445
  %v5453 = vmul.f32 %v5394, %v5445
  %v5454 = vmul.f32 %v5396, %v5445
  %v5455 = vmul.f32 %v5399, %v5445
  %v5456 = vmul.f32 %v5401, %v5445
  %v5457 = vmul.f32 %v5404, %v5445
  %v5458 = vmul.f32 %v5406, %v5445
  %v5459 = vmul.f32 %v5409, %v5445
  %v5460 = vmul.f32 %v5411, %v5445
  %v5461 = vmul.f32 %v5414, %v5445
  %v5462 = vmul.f32 %v5416, %v5445
  %v5463 = vmul.f32 %v5419, %v5445
  %v5464 = vmul.f32 %v5421, %v5445
  %v5465 = vmul.f32 %v5424, %v5445
  %v5466 = vmul.f32 %v5426, %v5445
  %v5467 = vmul.f32 %v5429, %v5445
  %v5468 = vmul.f32 %v5431, %v5445
  %v5469 = vmul.f32 %v5434, %v5445
  %v5470 = vmul.f32 %v5436, %v5445
  %v5471 = vmul.f32 %v5439, %v5445
  %v5472 = vmul.f32 %v5441, %v5445
  %v5473 = vld [vmem:[%s3] sm:$0x1]
  %v5475 = vperm.slane %v5473, 0
  %v5477 = vadd.f32 %v5447, %v5475
  %v5478 = vadd.f32 %v5448, %v5475
  %v5479 = vadd.f32 %v5449, %v5475
  %v5480 = vadd.f32 %v5450, %v5475
  %v5481 = vadd.f32 %v5451, %v5475
  %v5482 = vadd.f32 %v5452, %v5475
  %v5483 = vadd.f32 %v5453, %v5475
  %v5484 = vadd.f32 %v5454, %v5475
  %v5485 = vadd.f32 %v5455, %v5475
  %v5486 = vadd.f32 %v5456, %v5475
  %v5487 = vadd.f32 %v5457, %v5475
  %v5488 = vadd.f32 %v5458, %v5475
  %v5489 = vadd.f32 %v5459, %v5475
  %v5490 = vadd.f32 %v5460, %v5475
  %v5491 = vadd.f32 %v5461, %v5475
  %v5492 = vadd.f32 %v5462, %v5475
  %v5493 = vadd.f32 %v5463, %v5475
  %v5494 = vadd.f32 %v5464, %v5475
  %v5495 = vadd.f32 %v5465, %v5475
  %v5496 = vadd.f32 %v5466, %v5475
  %v5497 = vadd.f32 %v5467, %v5475
  %v5498 = vadd.f32 %v5468, %v5475
  %v5499 = vadd.f32 %v5469, %v5475
  %v5500 = vadd.f32 %v5470, %v5475
  %v5501 = vadd.f32 %v5471, %v5475
  %v5502 = vadd.f32 %v5472, %v5475
  %v5503 = vmul.f32 %v5477, 0.2
  %v5504 = vmul.f32 %v5478, 0.2
  %v5505 = vmul.f32 %v5479, 0.2
  %v5506 = vmul.f32 %v5480, 0.2
  %v5507 = vmul.f32 %v5481, 0.2
  %v5508 = vmul.f32 %v5482, 0.2
  %v5509 = vmul.f32 %v5483, 0.2
  %v5510 = vmul.f32 %v5484, 0.2
  %v5511 = vmul.f32 %v5485, 0.2
  %v5512 = vmul.f32 %v5486, 0.2
  %v5513 = vmul.f32 %v5487, 0.2
  %v5514 = vmul.f32 %v5488, 0.2
  %v5515 = vmul.f32 %v5489, 0.2
  %v5516 = vmul.f32 %v5490, 0.2
  %v5517 = vmul.f32 %v5491, 0.2
  %v5518 = vmul.f32 %v5492, 0.2
  %v5519 = vmul.f32 %v5493, 0.2
  %v5520 = vmul.f32 %v5494, 0.2
  %v5521 = vmul.f32 %v5495, 0.2
  %v5522 = vmul.f32 %v5496, 0.2
  %v5523 = vmul.f32 %v5497, 0.2
  %v5524 = vmul.f32 %v5498, 0.2
  %v5525 = vmul.f32 %v5499, 0.2
  %v5526 = vmul.f32 %v5500, 0.2
  %v5527 = vmul.f32 %v5501, 0.2
  %v5528 = vmul.f32 %v5502, 0.2
  %v5529 = vmax.f32 %v5477, %v5503
  %v5530 = vmax.f32 %v5478, %v5504
  %v5531 = vmax.f32 %v5479, %v5505
  %v5532 = vmax.f32 %v5480, %v5506
  %v5533 = vmax.f32 %v5481, %v5507
  %v5534 = vmax.f32 %v5482, %v5508
  %v5535 = vmax.f32 %v5483, %v5509
  %v5536 = vmax.f32 %v5484, %v5510
  %v5537 = vmax.f32 %v5485, %v5511
  %v5538 = vmax.f32 %v5486, %v5512
  %v5539 = vmax.f32 %v5487, %v5513
  %v5540 = vmax.f32 %v5488, %v5514
  %v5541 = vmax.f32 %v5489, %v5515
  %v5542 = vmax.f32 %v5490, %v5516
  %v5543 = vmax.f32 %v5491, %v5517
  %v5544 = vmax.f32 %v5492, %v5518
  %v5545 = vmax.f32 %v5493, %v5519
  %v5546 = vmax.f32 %v5494, %v5520
  %v5547 = vmax.f32 %v5495, %v5521
  %v5548 = vmax.f32 %v5496, %v5522
  %v5549 = vmax.f32 %v5497, %v5523
  %v5550 = vmax.f32 %v5498, %v5524
  %v5551 = vmax.f32 %v5499, %v5525
  %v5552 = vmax.f32 %v5500, %v5526
  %v5553 = vmax.f32 %v5501, %v5527
  %v5554 = vmax.f32 %v5502, %v5528
  %5555 = vst [vmem:[%s4] sm:$0xff] %v5529
  %5556 = vst [vmem:[%s4 + $0x8] sm:$0xff] %v5530
  %5557 = vst [vmem:[%s4 + $0x10] sm:$0xff] %v5531
  %5558 = vst [vmem:[%s4 + $0x18] sm:$0xff] %v5532
  %5559 = vst [vmem:[%s4 + $0x20] sm:$0xff] %v5533
  %5560 = vst [vmem:[%s4 + $0x28] sm:$0xff] %v5534
  %5561 = vst [vmem:[%s4 + $0x30] sm:$0xff] %v5535
  %5562 = vst [vmem:[%s4 + $0x38] sm:$0xff] %v5536
  %5563 = vst [vmem:[%s4 + $0x40] sm:$0xff] %v5537
  %5564 = vst [vmem:[%s4 + $0x48] sm:$0xff] %v5538
  %5565 = vst [vmem:[%s4 + $0x50] sm:$0xff] %v5539
  %5566 = vst [vmem:[%s4 + $0x58] sm:$0xff] %v5540
  %5567 = vst [vmem:[%s4 + $0x60] sm:$0xff] %v5541
  %5568 = vst [vmem:[%s4 + $0x68] sm:$0xff] %v5542
  %5569 = vst [vmem:[%s4 + $0x70] sm:$0xff] %v5543
  %5570 = vst [vmem:[%s4 + $0x78] sm:$0xff] %v5544
  %5571 = vst [vmem:[%s4 + $0x80] sm:$0xff] %v5545
  %5572 = vst [vmem:[%s4 + $0x88] sm:$0xff] %v5546
  %5573 = vst [vmem:[%s4 + $0x90] sm:$0xff] %v5547
  %5574 = vst [vmem:[%s4 + $0x98] sm:$0xff] %v5548
  %5575 = vst [vmem:[%s4 + $0xa0] sm:$0xff] %v5549
  %5576 = vst [vmem:[%s4 + $0xa8] sm:$0xff] %v5550
  %5577 = vst [vmem:[%s4 + $0xb0] sm:$0xff] %v5551
  %5578 = vst [vmem:[%s4 + $0xb8] sm:$0xff] %v5552
  %5579 = vst [vmem:[%s4 + $0xc0] sm:$0xff] %v5553
  %5580 = vst [vmem:[%s4 + $0xc8] sm:$0xff] %v5554
  // Predicated region
  $region18: #{forward.6} parent=0 // pred_check
    _
  $region19: #{forward.6} parent=0 // pred_check_branch
    %5582 = sbr.rel (0) target = $region21
  $region20: #{forward.6} parent=0 // pred_region
    _
  $region21: #{forward.6} parent=0 // pred_fallthru
    _
  // Predicated region
  $region22: #{forward.6} parent=0 // pred_check
    _
  $region23: #{forward.6} parent=0 // pred_check_branch
    %5584 = sbr.rel (0) target = $region25
  $region24: #{forward.6} parent=0 // pred_region
    _
  $region25: #{forward.6} parent=0 // pred_fallthru
    _

// kernel: forward.7
$region0: #{forward.7}
  #allocation0 [shape = 'u32[]', space=smem, size = 0x4, offset = 0x4, fixed_abs, tag = 'smem constant byte address 0x4 - core index']
  #allocation1 [shape = 'u32[72,128]{1,0:T(1,128)}', space=vmem, size = 0x9000, scoped, tag = 'internal scratch']
  %s0 = inlined_call_operand.vmem [shape: bf16[16,12800], index: 0, kind: input, shape index: {}]
  %s1 = inlined_call_operand.vmem [shape: bf16[12800,128], index: 1, kind: input, shape index: {}]
  %s2 = inlined_call_operand.vmem [shape: f32[1,128], index: 2, kind: input, shape index: {}]
  %s3 = inlined_call_operand.vmem [shape: f32[1,128], index: 3, kind: input, shape index: {}]
  %s4 = inlined_call_operand.vmem [shape: f32[16,128], index: 4, kind: output, shape index: {}]
  %s5 = sld [smem:[#allocation0]]
  $region26: #{forward.7} parent=0
    _
  %s7 = ssub.s32 1, %s5
  %s8 = scalar_select 0, %s7, %s5
  // Predicated region
  $region2: #{forward.7} parent=0 // pred_check
    _
  $region3: #{forward.7} parent=0 // pred_check_branch
    %10 = sbr.rel (0) target = $region5
  $region4: #{forward.7} parent=0 // pred_region
    _
  $region5: #{forward.7} parent=0 // pred_fallthru
    _
  // Predicated region
  $region6: #{forward.7} parent=0 // pred_check
    _
  $region7: #{forward.7} parent=0 // pred_check_branch
    %12 = sbr.rel (0) target = $region9
  $region8: #{forward.7} parent=0 // pred_region
    _
  $region9: #{forward.7} parent=0 // pred_fallthru
    _
  // Predicated region
  $region10: #{forward.7} parent=0 // pred_check
    _
  $region11: #{forward.7} parent=0 // pred_check_branch
    %14 = sbr.rel (0) target = $region13
  $region12: #{forward.7} parent=0 // pred_region
    _
  $region13: #{forward.7} parent=0 // pred_fallthru
    _
  // Predicated region
  $region14: #{forward.7} parent=0 // pred_check
    _
  $region15: #{forward.7} parent=0 // pred_check_branch
    %16 = sbr.rel (0) target = $region17
  $region16: #{forward.7} parent=0 // pred_region
    _
  $region17: #{forward.7} parent=0 // pred_fallthru
    _
  %v17 = vld [vmem:[%s0] sm:$0xff]
  %v18 = vld [vmem:[%s0 + $0x8] sm:$0xff]
  %v19 = vld [vmem:[%s0 + $0x10] sm:$0xff]
  %v20 = vld [vmem:[%s0 + $0x18] sm:$0xff]
  %v21 = vld [vmem:[%s0 + $0x20] sm:$0xff]
  %v22 = vld [vmem:[%s0 + $0x28] sm:$0xff]
  %v23 = vld [vmem:[%s0 + $0x30] sm:$0xff]
  %v24 = vld [vmem:[%s0 + $0x38] sm:$0xff]
  %v25 = vld [vmem:[%s0 + $0x40] sm:$0xff]
  %v26 = vld [vmem:[%s0 + $0x48] sm:$0xff]
  %v27 = vld [vmem:[%s0 + $0x50] sm:$0xff]
  %v28 = vld [vmem:[%s0 + $0x58] sm:$0xff]
  %v29 = vld [vmem:[%s0 + $0x60] sm:$0xff]
  %v30 = vld [vmem:[%s0 + $0x68] sm:$0xff]
  %v31 = vld [vmem:[%s0 + $0x70] sm:$0xff]
  %v32 = vld [vmem:[%s0 + $0x78] sm:$0xff]
  %v33 = vld [vmem:[%s0 + $0x80] sm:$0xff]
  %v34 = vld [vmem:[%s0 + $0x88] sm:$0xff]
  %v35 = vld [vmem:[%s0 + $0x90] sm:$0xff]
  %v36 = vld [vmem:[%s0 + $0x98] sm:$0xff]
  %v37 = vld [vmem:[%s0 + $0xa0] sm:$0xff]
  %v38 = vld [vmem:[%s0 + $0xa8] sm:$0xff]
  %v39 = vld [vmem:[%s0 + $0xb0] sm:$0xff]
  %v40 = vld [vmem:[%s0 + $0xb8] sm:$0xff]
  %v41 = vld [vmem:[%s0 + $0xc0] sm:$0xff]
  %v42 = vld [vmem:[%s0 + $0xc8] sm:$0xff]
  %v43 = vld [vmem:[%s0 + $0xd0] sm:$0xff]
  %v44 = vld [vmem:[%s0 + $0xd8] sm:$0xff]
  %v45 = vld [vmem:[%s0 + $0xe0] sm:$0xff]
  %v46 = vld [vmem:[%s0 + $0xe8] sm:$0xff]
  %v47 = vld [vmem:[%s0 + $0xf0] sm:$0xff]
  %v48 = vld [vmem:[%s0 + $0xf8] sm:$0xff]
  %v49 = vld [vmem:[%s0 + $0x100] sm:$0xff]
  %v50 = vld [vmem:[%s0 + $0x108] sm:$0xff]
  %v51 = vld [vmem:[%s0 + $0x110] sm:$0xff]
  %v52 = vld [vmem:[%s0 + $0x118] sm:$0xff]
  %v53 = vld [vmem:[%s0 + $0x120] sm:$0xff]
  %v54 = vld [vmem:[%s0 + $0x128] sm:$0xff]
  %v55 = vld [vmem:[%s0 + $0x130] sm:$0xff]
  %v56 = vld [vmem:[%s0 + $0x138] sm:$0xff]
  %v57 = vld [vmem:[%s0 + $0x140] sm:$0xff]
  %v58 = vld [vmem:[%s0 + $0x148] sm:$0xff]
  %v59 = vld [vmem:[%s0 + $0x150] sm:$0xff]
  %v60 = vld [vmem:[%s0 + $0x158] sm:$0xff]
  %v61 = vld [vmem:[%s0 + $0x160] sm:$0xff]
  %v62 = vld [vmem:[%s0 + $0x168] sm:$0xff]
  %v63 = vld [vmem:[%s0 + $0x170] sm:$0xff]
  %v64 = vld [vmem:[%s0 + $0x178] sm:$0xff]
  %v65 = vld [vmem:[%s0 + $0x180] sm:$0xff]
  %v66 = vld [vmem:[%s0 + $0x188] sm:$0xff]
  %v67 = vld [vmem:[%s0 + $0x190] sm:$0xff]
  %v68 = vld [vmem:[%s0 + $0x198] sm:$0xff]
  %v69 = vld [vmem:[%s0 + $0x1a0] sm:$0xff]
  %v70 = vld [vmem:[%s0 + $0x1a8] sm:$0xff]
  %v71 = vld [vmem:[%s0 + $0x1b0] sm:$0xff]
  %v72 = vld [vmem:[%s0 + $0x1b8] sm:$0xff]
  %v73 = vld [vmem:[%s0 + $0x1c0] sm:$0xff]
  %v74 = vld [vmem:[%s0 + $0x1c8] sm:$0xff]
  %v75 = vld [vmem:[%s0 + $0x1d0] sm:$0xff]
  %v76 = vld [vmem:[%s0 + $0x1d8] sm:$0xff]
  %v77 = vld [vmem:[%s0 + $0x1e0] sm:$0xff]
  %v78 = vld [vmem:[%s0 + $0x1e8] sm:$0xff]
  %v79 = vld [vmem:[%s0 + $0x1f0] sm:$0xff]
  %v80 = vld [vmem:[%s0 + $0x1f8] sm:$0xff]
  %v81 = vld [vmem:[%s0 + $0x200] sm:$0xff]
  %v82 = vld [vmem:[%s0 + $0x208] sm:$0xff]
  %v83 = vld [vmem:[%s0 + $0x210] sm:$0xff]
  %v84 = vld [vmem:[%s0 + $0x218] sm:$0xff]
  %v85 = vld [vmem:[%s0 + $0x220] sm:$0xff]
  %v86 = vld [vmem:[%s0 + $0x228] sm:$0xff]
  %v87 = vld [vmem:[%s0 + $0x230] sm:$0xff]
  %v88 = vld [vmem:[%s0 + $0x238] sm:$0xff]
  %v89 = vld [vmem:[%s0 + $0x240] sm:$0xff]
  %v90 = vld [vmem:[%s0 + $0x248] sm:$0xff]
  %v91 = vld [vmem:[%s0 + $0x250] sm:$0xff]
  %v92 = vld [vmem:[%s0 + $0x258] sm:$0xff]
  %v93 = vld [vmem:[%s0 + $0x260] sm:$0xff]
  %v94 = vld [vmem:[%s0 + $0x268] sm:$0xff]
  %v95 = vld [vmem:[%s0 + $0x270] sm:$0xff]
  %v96 = vld [vmem:[%s0 + $0x278] sm:$0xff]
  %v97 = vld [vmem:[%s0 + $0x280] sm:$0xff]
  %v98 = vld [vmem:[%s0 + $0x288] sm:$0xff]
  %v99 = vld [vmem:[%s0 + $0x290] sm:$0xff]
  %v100 = vld [vmem:[%s0 + $0x298] sm:$0xff]
  %v101 = vld [vmem:[%s0 + $0x2a0] sm:$0xff]
  %v102 = vld [vmem:[%s0 + $0x2a8] sm:$0xff]
  %v103 = vld [vmem:[%s0 + $0x2b0] sm:$0xff]
  %v104 = vld [vmem:[%s0 + $0x2b8] sm:$0xff]
  %v105 = vld [vmem:[%s0 + $0x2c0] sm:$0xff]
  %v106 = vld [vmem:[%s0 + $0x2c8] sm:$0xff]
  %v107 = vld [vmem:[%s0 + $0x2d0] sm:$0xff]
  %v108 = vld [vmem:[%s0 + $0x2d8] sm:$0xff]
  %v109 = vld [vmem:[%s0 + $0x2e0] sm:$0xff]
  %v110 = vld [vmem:[%s0 + $0x2e8] sm:$0xff]
  %v111 = vld [vmem:[%s0 + $0x2f0] sm:$0xff]
  %v112 = vld [vmem:[%s0 + $0x2f8] sm:$0xff]
  %v113 = vld [vmem:[%s0 + $0x300] sm:$0xff]
  %v114 = vld [vmem:[%s0 + $0x308] sm:$0xff]
  %v115 = vld [vmem:[%s0 + $0x310] sm:$0xff]
  %v116 = vld [vmem:[%s0 + $0x318] sm:$0xff]
  %v117 = vld [vmem:[%s1] sm:$0xf]
  %v118 = vld [vmem:[%s1 + $0x4] sm:$0xf]
  %v119 = vld [vmem:[%s1 + $0x8] sm:$0xf]
  %v120 = vld [vmem:[%s1 + $0xc] sm:$0xf]
  %v121 = vld [vmem:[%s1 + $0x10] sm:$0xf]
  %v122 = vld [vmem:[%s1 + $0x14] sm:$0xf]
  %v123 = vld [vmem:[%s1 + $0x18] sm:$0xf]
  %v124 = vld [vmem:[%s1 + $0x1c] sm:$0xf]
  %v125 = vld [vmem:[%s1 + $0x20] sm:$0xf]
  %v126 = vld [vmem:[%s1 + $0x24] sm:$0xf]
  %v127 = vld [vmem:[%s1 + $0x28] sm:$0xf]
  %v128 = vld [vmem:[%s1 + $0x2c] sm:$0xf]
  %v129 = vld [vmem:[%s1 + $0x30] sm:$0xf]
  %v130 = vld [vmem:[%s1 + $0x34] sm:$0xf]
  %v131 = vld [vmem:[%s1 + $0x38] sm:$0xf]
  %v132 = vld [vmem:[%s1 + $0x3c] sm:$0xf]
  %v133 = vld [vmem:[%s1 + $0x40] sm:$0xf]
  %v134 = vld [vmem:[%s1 + $0x44] sm:$0xf]
  %v135 = vld [vmem:[%s1 + $0x48] sm:$0xf]
  %v136 = vld [vmem:[%s1 + $0x4c] sm:$0xf]
  %v137 = vld [vmem:[%s1 + $0x50] sm:$0xf]
  %v138 = vld [vmem:[%s1 + $0x54] sm:$0xf]
  %v139 = vld [vmem:[%s1 + $0x58] sm:$0xf]
  %v140 = vld [vmem:[%s1 + $0x5c] sm:$0xf]
  %v141 = vld [vmem:[%s1 + $0x60] sm:$0xf]
  %v142 = vld [vmem:[%s1 + $0x64] sm:$0xf]
  %v143 = vld [vmem:[%s1 + $0x68] sm:$0xf]
  %v144 = vld [vmem:[%s1 + $0x6c] sm:$0xf]
  %v145 = vld [vmem:[%s1 + $0x70] sm:$0xf]
  %v146 = vld [vmem:[%s1 + $0x74] sm:$0xf]
  %v147 = vld [vmem:[%s1 + $0x78] sm:$0xf]
  %v148 = vld [vmem:[%s1 + $0x7c] sm:$0xf]
  %v149 = vld [vmem:[%s1 + $0x80] sm:$0xf]
  %v150 = vld [vmem:[%s1 + $0x84] sm:$0xf]
  %v151 = vld [vmem:[%s1 + $0x88] sm:$0xf]
  %v152 = vld [vmem:[%s1 + $0x8c] sm:$0xf]
  %v153 = vld [vmem:[%s1 + $0x90] sm:$0xf]
  %v154 = vld [vmem:[%s1 + $0x94] sm:$0xf]
  %v155 = vld [vmem:[%s1 + $0x98] sm:$0xf]
  %v156 = vld [vmem:[%s1 + $0x9c] sm:$0xf]
  %v157 = vld [vmem:[%s1 + $0xa0] sm:$0xf]
  %v158 = vld [vmem:[%s1 + $0xa4] sm:$0xf]
  %v159 = vld [vmem:[%s1 + $0xa8] sm:$0xf]
  %v160 = vld [vmem:[%s1 + $0xac] sm:$0xf]
  %v161 = vld [vmem:[%s1 + $0xb0] sm:$0xf]
  %v162 = vld [vmem:[%s1 + $0xb4] sm:$0xf]
  %v163 = vld [vmem:[%s1 + $0xb8] sm:$0xf]
  %v164 = vld [vmem:[%s1 + $0xbc] sm:$0xf]
  %v165 = vld [vmem:[%s1 + $0xc0] sm:$0xf]
  %v166 = vld [vmem:[%s1 + $0xc4] sm:$0xf]
  %v167 = vld [vmem:[%s1 + $0xc8] sm:$0xf]
  %v168 = vld [vmem:[%s1 + $0xcc] sm:$0xf]
  %v169 = vld [vmem:[%s1 + $0xd0] sm:$0xf]
  %v170 = vld [vmem:[%s1 + $0xd4] sm:$0xf]
  %v171 = vld [vmem:[%s1 + $0xd8] sm:$0xf]
  %v172 = vld [vmem:[%s1 + $0xdc] sm:$0xf]
  %v173 = vld [vmem:[%s1 + $0xe0] sm:$0xf]
  %v174 = vld [vmem:[%s1 + $0xe4] sm:$0xf]
  %v175 = vld [vmem:[%s1 + $0xe8] sm:$0xf]
  %v176 = vld [vmem:[%s1 + $0xec] sm:$0xf]
  %v177 = vld [vmem:[%s1 + $0xf0] sm:$0xf]
  %v178 = vld [vmem:[%s1 + $0xf4] sm:$0xf]
  %v179 = vld [vmem:[%s1 + $0xf8] sm:$0xf]
  %v180 = vld [vmem:[%s1 + $0xfc] sm:$0xf]
  %v181 = vld [vmem:[%s1 + $0x100] sm:$0xf]
  %v182 = vld [vmem:[%s1 + $0x104] sm:$0xf]
  %v183 = vld [vmem:[%s1 + $0x108] sm:$0xf]
  %v184 = vld [vmem:[%s1 + $0x10c] sm:$0xf]
  %v185 = vld [vmem:[%s1 + $0x110] sm:$0xf]
  %v186 = vld [vmem:[%s1 + $0x114] sm:$0xf]
  %v187 = vld [vmem:[%s1 + $0x118] sm:$0xf]
  %v188 = vld [vmem:[%s1 + $0x11c] sm:$0xf]
  %v189 = vld [vmem:[%s1 + $0x120] sm:$0xf]
  %v190 = vld [vmem:[%s1 + $0x124] sm:$0xf]
  %v191 = vld [vmem:[%s1 + $0x128] sm:$0xf]
  %v192 = vld [vmem:[%s1 + $0x12c] sm:$0xf]
  %v193 = vld [vmem:[%s1 + $0x130] sm:$0xf]
  %v194 = vld [vmem:[%s1 + $0x134] sm:$0xf]
  %v195 = vld [vmem:[%s1 + $0x138] sm:$0xf]
  %v196 = vld [vmem:[%s1 + $0x13c] sm:$0xf]
  %v197 = vld [vmem:[%s1 + $0x140] sm:$0xf]
  %v198 = vld [vmem:[%s1 + $0x144] sm:$0xf]
  %v199 = vld [vmem:[%s1 + $0x148] sm:$0xf]
  %v200 = vld [vmem:[%s1 + $0x14c] sm:$0xf]
  %v201 = vld [vmem:[%s1 + $0x150] sm:$0xf]
  %v202 = vld [vmem:[%s1 + $0x154] sm:$0xf]
  %v203 = vld [vmem:[%s1 + $0x158] sm:$0xf]
  %v204 = vld [vmem:[%s1 + $0x15c] sm:$0xf]
  %v205 = vld [vmem:[%s1 + $0x160] sm:$0xf]
  %v206 = vld [vmem:[%s1 + $0x164] sm:$0xf]
  %v207 = vld [vmem:[%s1 + $0x168] sm:$0xf]
  %v208 = vld [vmem:[%s1 + $0x16c] sm:$0xf]
  %v209 = vld [vmem:[%s1 + $0x170] sm:$0xf]
  %v210 = vld [vmem:[%s1 + $0x174] sm:$0xf]
  %v211 = vld [vmem:[%s1 + $0x178] sm:$0xf]
  %v212 = vld [vmem:[%s1 + $0x17c] sm:$0xf]
  %v213 = vld [vmem:[%s1 + $0x180] sm:$0xf]
  %v214 = vld [vmem:[%s1 + $0x184] sm:$0xf]
  %v215 = vld [vmem:[%s1 + $0x188] sm:$0xf]
  %v216 = vld [vmem:[%s1 + $0x18c] sm:$0xf]
  %v217 = vld [vmem:[%s1 + $0x190] sm:$0xf]
  %v218 = vld [vmem:[%s1 + $0x194] sm:$0xf]
  %v219 = vld [vmem:[%s1 + $0x198] sm:$0xf]
  %v220 = vld [vmem:[%s1 + $0x19c] sm:$0xf]
  %v221 = vld [vmem:[%s1 + $0x1a0] sm:$0xf]
  %v222 = vld [vmem:[%s1 + $0x1a4] sm:$0xf]
  %v223 = vld [vmem:[%s1 + $0x1a8] sm:$0xf]
  %v224 = vld [vmem:[%s1 + $0x1ac] sm:$0xf]
  %v225 = vld [vmem:[%s1 + $0x1b0] sm:$0xf]
  %v226 = vld [vmem:[%s1 + $0x1b4] sm:$0xf]
  %v227 = vld [vmem:[%s1 + $0x1b8] sm:$0xf]
  %v228 = vld [vmem:[%s1 + $0x1bc] sm:$0xf]
  %v229 = vld [vmem:[%s1 + $0x1c0] sm:$0xf]
  %v230 = vld [vmem:[%s1 + $0x1c4] sm:$0xf]
  %v231 = vld [vmem:[%s1 + $0x1c8] sm:$0xf]
  %v232 = vld [vmem:[%s1 + $0x1cc] sm:$0xf]
  %v233 = vld [vmem:[%s1 + $0x1d0] sm:$0xf]
  %v234 = vld [vmem:[%s1 + $0x1d4] sm:$0xf]
  %v235 = vld [vmem:[%s1 + $0x1d8] sm:$0xf]
  %v236 = vld [vmem:[%s1 + $0x1dc] sm:$0xf]
  %v237 = vld [vmem:[%s1 + $0x1e0] sm:$0xf]
  %v238 = vld [vmem:[%s1 + $0x1e4] sm:$0xf]
  %v239 = vld [vmem:[%s1 + $0x1e8] sm:$0xf]
  %v240 = vld [vmem:[%s1 + $0x1ec] sm:$0xf]
  %v241 = vld [vmem:[%s1 + $0x1f0] sm:$0xf]
  %v242 = vld [vmem:[%s1 + $0x1f4] sm:$0xf]
  %v243 = vld [vmem:[%s1 + $0x1f8] sm:$0xf]
  %v244 = vld [vmem:[%s1 + $0x1fc] sm:$0xf]
  %v245 = vld [vmem:[%s1 + $0x200] sm:$0xf]
  %v246 = vld [vmem:[%s1 + $0x204] sm:$0xf]
  %v247 = vld [vmem:[%s1 + $0x208] sm:$0xf]
  %v248 = vld [vmem:[%s1 + $0x20c] sm:$0xf]
  %v249 = vld [vmem:[%s1 + $0x210] sm:$0xf]
  %v250 = vld [vmem:[%s1 + $0x214] sm:$0xf]
  %v251 = vld [vmem:[%s1 + $0x218] sm:$0xf]
  %v252 = vld [vmem:[%s1 + $0x21c] sm:$0xf]
  %v253 = vld [vmem:[%s1 + $0x220] sm:$0xf]
  %v254 = vld [vmem:[%s1 + $0x224] sm:$0xf]
  %v255 = vld [vmem:[%s1 + $0x228] sm:$0xf]
  %v256 = vld [vmem:[%s1 + $0x22c] sm:$0xf]
  %v257 = vld [vmem:[%s1 + $0x230] sm:$0xf]
  %v258 = vld [vmem:[%s1 + $0x234] sm:$0xf]
  %v259 = vld [vmem:[%s1 + $0x238] sm:$0xf]
  %v260 = vld [vmem:[%s1 + $0x23c] sm:$0xf]
  %v261 = vld [vmem:[%s1 + $0x240] sm:$0xf]
  %v262 = vld [vmem:[%s1 + $0x244] sm:$0xf]
  %v263 = vld [vmem:[%s1 + $0x248] sm:$0xf]
  %v264 = vld [vmem:[%s1 + $0x24c] sm:$0xf]
  %v265 = vld [vmem:[%s1 + $0x250] sm:$0xf]
  %v266 = vld [vmem:[%s1 + $0x254] sm:$0xf]
  %v267 = vld [vmem:[%s1 + $0x258] sm:$0xf]
  %v268 = vld [vmem:[%s1 + $0x25c] sm:$0xf]
  %v269 = vld [vmem:[%s1 + $0x260] sm:$0xf]
  %v270 = vld [vmem:[%s1 + $0x264] sm:$0xf]
  %v271 = vld [vmem:[%s1 + $0x268] sm:$0xf]
  %v272 = vld [vmem:[%s1 + $0x26c] sm:$0xf]
  %v273 = vld [vmem:[%s1 + $0x270] sm:$0xf]
  %v274 = vld [vmem:[%s1 + $0x274] sm:$0xf]
  %v275 = vld [vmem:[%s1 + $0x278] sm:$0xf]
  %v276 = vld [vmem:[%s1 + $0x27c] sm:$0xf]
  %v277 = vld [vmem:[%s1 + $0x280] sm:$0xf]
  %v278 = vld [vmem:[%s1 + $0x284] sm:$0xf]
  %v279 = vld [vmem:[%s1 + $0x288] sm:$0xf]
  %v280 = vld [vmem:[%s1 + $0x28c] sm:$0xf]
  %v281 = vld [vmem:[%s1 + $0x290] sm:$0xf]
  %v282 = vld [vmem:[%s1 + $0x294] sm:$0xf]
  %v283 = vld [vmem:[%s1 + $0x298] sm:$0xf]
  %v284 = vld [vmem:[%s1 + $0x29c] sm:$0xf]
  %v285 = vld [vmem:[%s1 + $0x2a0] sm:$0xf]
  %v286 = vld [vmem:[%s1 + $0x2a4] sm:$0xf]
  %v287 = vld [vmem:[%s1 + $0x2a8] sm:$0xf]
  %v288 = vld [vmem:[%s1 + $0x2ac] sm:$0xf]
  %v289 = vld [vmem:[%s1 + $0x2b0] sm:$0xf]
  %v290 = vld [vmem:[%s1 + $0x2b4] sm:$0xf]
  %v291 = vld [vmem:[%s1 + $0x2b8] sm:$0xf]
  %v292 = vld [vmem:[%s1 + $0x2bc] sm:$0xf]
  %v293 = vld [vmem:[%s1 + $0x2c0] sm:$0xf]
  %v294 = vld [vmem:[%s1 + $0x2c4] sm:$0xf]
  %v295 = vld [vmem:[%s1 + $0x2c8] sm:$0xf]
  %v296 = vld [vmem:[%s1 + $0x2cc] sm:$0xf]
  %v297 = vld [vmem:[%s1 + $0x2d0] sm:$0xf]
  %v298 = vld [vmem:[%s1 + $0x2d4] sm:$0xf]
  %v299 = vld [vmem:[%s1 + $0x2d8] sm:$0xf]
  %v300 = vld [vmem:[%s1 + $0x2dc] sm:$0xf]
  %v301 = vld [vmem:[%s1 + $0x2e0] sm:$0xf]
  %v302 = vld [vmem:[%s1 + $0x2e4] sm:$0xf]
  %v303 = vld [vmem:[%s1 + $0x2e8] sm:$0xf]
  %v304 = vld [vmem:[%s1 + $0x2ec] sm:$0xf]
  %v305 = vld [vmem:[%s1 + $0x2f0] sm:$0xf]
  %v306 = vld [vmem:[%s1 + $0x2f4] sm:$0xf]
  %v307 = vld [vmem:[%s1 + $0x2f8] sm:$0xf]
  %v308 = vld [vmem:[%s1 + $0x2fc] sm:$0xf]
  %v309 = vld [vmem:[%s1 + $0x300] sm:$0xf]
  %v310 = vld [vmem:[%s1 + $0x304] sm:$0xf]
  %v311 = vld [vmem:[%s1 + $0x308] sm:$0xf]
  %v312 = vld [vmem:[%s1 + $0x30c] sm:$0xf]
  %v313 = vld [vmem:[%s1 + $0x310] sm:$0xf]
  %v314 = vld [vmem:[%s1 + $0x314] sm:$0xf]
  %v315 = vld [vmem:[%s1 + $0x318] sm:$0xf]
  %v316 = vld [vmem:[%s1 + $0x31c] sm:$0xf]
  %v317 = vld [vmem:[%s1 + $0x320] sm:$0xf]
  %v318 = vld [vmem:[%s1 + $0x324] sm:$0xf]
  %v319 = vld [vmem:[%s1 + $0x328] sm:$0xf]
  %v320 = vld [vmem:[%s1 + $0x32c] sm:$0xf]
  %v321 = vld [vmem:[%s1 + $0x330] sm:$0xf]
  %v322 = vld [vmem:[%s1 + $0x334] sm:$0xf]
  %v323 = vld [vmem:[%s1 + $0x338] sm:$0xf]
  %v324 = vld [vmem:[%s1 + $0x33c] sm:$0xf]
  %v325 = vld [vmem:[%s1 + $0x340] sm:$0xf]
  %v326 = vld [vmem:[%s1 + $0x344] sm:$0xf]
  %v327 = vld [vmem:[%s1 + $0x348] sm:$0xf]
  %v328 = vld [vmem:[%s1 + $0x34c] sm:$0xf]
  %v329 = vld [vmem:[%s1 + $0x350] sm:$0xf]
  %v330 = vld [vmem:[%s1 + $0x354] sm:$0xf]
  %v331 = vld [vmem:[%s1 + $0x358] sm:$0xf]
  %v332 = vld [vmem:[%s1 + $0x35c] sm:$0xf]
  %v333 = vld [vmem:[%s1 + $0x360] sm:$0xf]
  %v334 = vld [vmem:[%s1 + $0x364] sm:$0xf]
  %v335 = vld [vmem:[%s1 + $0x368] sm:$0xf]
  %v336 = vld [vmem:[%s1 + $0x36c] sm:$0xf]
  %v337 = vld [vmem:[%s1 + $0x370] sm:$0xf]
  %v338 = vld [vmem:[%s1 + $0x374] sm:$0xf]
  %v339 = vld [vmem:[%s1 + $0x378] sm:$0xf]
  %v340 = vld [vmem:[%s1 + $0x37c] sm:$0xf]
  %v341 = vld [vmem:[%s1 + $0x380] sm:$0xf]
  %v342 = vld [vmem:[%s1 + $0x384] sm:$0xf]
  %v343 = vld [vmem:[%s1 + $0x388] sm:$0xf]
  %v344 = vld [vmem:[%s1 + $0x38c] sm:$0xf]
  %v345 = vld [vmem:[%s1 + $0x390] sm:$0xf]
  %v346 = vld [vmem:[%s1 + $0x394] sm:$0xf]
  %v347 = vld [vmem:[%s1 + $0x398] sm:$0xf]
  %v348 = vld [vmem:[%s1 + $0x39c] sm:$0xf]
  %v349 = vld [vmem:[%s1 + $0x3a0] sm:$0xf]
  %v350 = vld [vmem:[%s1 + $0x3a4] sm:$0xf]
  %v351 = vld [vmem:[%s1 + $0x3a8] sm:$0xf]
  %v352 = vld [vmem:[%s1 + $0x3ac] sm:$0xf]
  %v353 = vld [vmem:[%s1 + $0x3b0] sm:$0xf]
  %v354 = vld [vmem:[%s1 + $0x3b4] sm:$0xf]
  %v355 = vld [vmem:[%s1 + $0x3b8] sm:$0xf]
  %v356 = vld [vmem:[%s1 + $0x3bc] sm:$0xf]
  %v357 = vld [vmem:[%s1 + $0x3c0] sm:$0xf]
  %v358 = vld [vmem:[%s1 + $0x3c4] sm:$0xf]
  %v359 = vld [vmem:[%s1 + $0x3c8] sm:$0xf]
  %v360 = vld [vmem:[%s1 + $0x3cc] sm:$0xf]
  %v361 = vld [vmem:[%s1 + $0x3d0] sm:$0xf]
  %v362 = vld [vmem:[%s1 + $0x3d4] sm:$0xf]
  %v363 = vld [vmem:[%s1 + $0x3d8] sm:$0xf]
  %v364 = vld [vmem:[%s1 + $0x3dc] sm:$0xf]
  %v365 = vld [vmem:[%s1 + $0x3e0] sm:$0xf]
  %v366 = vld [vmem:[%s1 + $0x3e4] sm:$0xf]
  %v367 = vld [vmem:[%s1 + $0x3e8] sm:$0xf]
  %v368 = vld [vmem:[%s1 + $0x3ec] sm:$0xf]
  %v369 = vld [vmem:[%s1 + $0x3f0] sm:$0xf]
  %v370 = vld [vmem:[%s1 + $0x3f4] sm:$0xf]
  %v371 = vld [vmem:[%s1 + $0x3f8] sm:$0xf]
  %v372 = vld [vmem:[%s1 + $0x3fc] sm:$0xf]
  %v373 = vld [vmem:[%s1 + $0x400] sm:$0xf]
  %v374 = vld [vmem:[%s1 + $0x404] sm:$0xf]
  %v375 = vld [vmem:[%s1 + $0x408] sm:$0xf]
  %v376 = vld [vmem:[%s1 + $0x40c] sm:$0xf]
  %v377 = vld [vmem:[%s1 + $0x410] sm:$0xf]
  %v378 = vld [vmem:[%s1 + $0x414] sm:$0xf]
  %v379 = vld [vmem:[%s1 + $0x418] sm:$0xf]
  %v380 = vld [vmem:[%s1 + $0x41c] sm:$0xf]
  %v381 = vld [vmem:[%s1 + $0x420] sm:$0xf]
  %v382 = vld [vmem:[%s1 + $0x424] sm:$0xf]
  %v383 = vld [vmem:[%s1 + $0x428] sm:$0xf]
  %v384 = vld [vmem:[%s1 + $0x42c] sm:$0xf]
  %v385 = vld [vmem:[%s1 + $0x430] sm:$0xf]
  %v386 = vld [vmem:[%s1 + $0x434] sm:$0xf]
  %v387 = vld [vmem:[%s1 + $0x438] sm:$0xf]
  %v388 = vld [vmem:[%s1 + $0x43c] sm:$0xf]
  %v389 = vld [vmem:[%s1 + $0x440] sm:$0xf]
  %v390 = vld [vmem:[%s1 + $0x444] sm:$0xf]
  %v391 = vld [vmem:[%s1 + $0x448] sm:$0xf]
  %v392 = vld [vmem:[%s1 + $0x44c] sm:$0xf]
  %v393 = vld [vmem:[%s1 + $0x450] sm:$0xf]
  %v394 = vld [vmem:[%s1 + $0x454] sm:$0xf]
  %v395 = vld [vmem:[%s1 + $0x458] sm:$0xf]
  %v396 = vld [vmem:[%s1 + $0x45c] sm:$0xf]
  %v397 = vld [vmem:[%s1 + $0x460] sm:$0xf]
  %v398 = vld [vmem:[%s1 + $0x464] sm:$0xf]
  %v399 = vld [vmem:[%s1 + $0x468] sm:$0xf]
  %v400 = vld [vmem:[%s1 + $0x46c] sm:$0xf]
  %v401 = vld [vmem:[%s1 + $0x470] sm:$0xf]
  %v402 = vld [vmem:[%s1 + $0x474] sm:$0xf]
  %v403 = vld [vmem:[%s1 + $0x478] sm:$0xf]
  %v404 = vld [vmem:[%s1 + $0x47c] sm:$0xf]
  %v405 = vld [vmem:[%s1 + $0x480] sm:$0xf]
  %v406 = vld [vmem:[%s1 + $0x484] sm:$0xf]
  %v407 = vld [vmem:[%s1 + $0x488] sm:$0xf]
  %v408 = vld [vmem:[%s1 + $0x48c] sm:$0xf]
  %v409 = vld [vmem:[%s1 + $0x490] sm:$0xf]
  %v410 = vld [vmem:[%s1 + $0x494] sm:$0xf]
  %v411 = vld [vmem:[%s1 + $0x498] sm:$0xf]
  %v412 = vld [vmem:[%s1 + $0x49c] sm:$0xf]
  %v413 = vld [vmem:[%s1 + $0x4a0] sm:$0xf]
  %v414 = vld [vmem:[%s1 + $0x4a4] sm:$0xf]
  %v415 = vld [vmem:[%s1 + $0x4a8] sm:$0xf]
  %v416 = vld [vmem:[%s1 + $0x4ac] sm:$0xf]
  %v417 = vld [vmem:[%s1 + $0x4b0] sm:$0xf]
  %v418 = vld [vmem:[%s1 + $0x4b4] sm:$0xf]
  %v419 = vld [vmem:[%s1 + $0x4b8] sm:$0xf]
  %v420 = vld [vmem:[%s1 + $0x4bc] sm:$0xf]
  %v421 = vld [vmem:[%s1 + $0x4c0] sm:$0xf]
  %v422 = vld [vmem:[%s1 + $0x4c4] sm:$0xf]
  %v423 = vld [vmem:[%s1 + $0x4c8] sm:$0xf]
  %v424 = vld [vmem:[%s1 + $0x4cc] sm:$0xf]
  %v425 = vld [vmem:[%s1 + $0x4d0] sm:$0xf]
  %v426 = vld [vmem:[%s1 + $0x4d4] sm:$0xf]
  %v427 = vld [vmem:[%s1 + $0x4d8] sm:$0xf]
  %v428 = vld [vmem:[%s1 + $0x4dc] sm:$0xf]
  %v429 = vld [vmem:[%s1 + $0x4e0] sm:$0xf]
  %v430 = vld [vmem:[%s1 + $0x4e4] sm:$0xf]
  %v431 = vld [vmem:[%s1 + $0x4e8] sm:$0xf]
  %v432 = vld [vmem:[%s1 + $0x4ec] sm:$0xf]
  %v433 = vld [vmem:[%s1 + $0x4f0] sm:$0xf]
  %v434 = vld [vmem:[%s1 + $0x4f4] sm:$0xf]
  %v435 = vld [vmem:[%s1 + $0x4f8] sm:$0xf]
  %v436 = vld [vmem:[%s1 + $0x4fc] sm:$0xf]
  %v437 = vld [vmem:[%s1 + $0x500] sm:$0xf]
  %v438 = vld [vmem:[%s1 + $0x504] sm:$0xf]
  %v439 = vld [vmem:[%s1 + $0x508] sm:$0xf]
  %v440 = vld [vmem:[%s1 + $0x50c] sm:$0xf]
  %v441 = vld [vmem:[%s1 + $0x510] sm:$0xf]
  %v442 = vld [vmem:[%s1 + $0x514] sm:$0xf]
  %v443 = vld [vmem:[%s1 + $0x518] sm:$0xf]
  %v444 = vld [vmem:[%s1 + $0x51c] sm:$0xf]
  %v445 = vld [vmem:[%s1 + $0x520] sm:$0xf]
  %v446 = vld [vmem:[%s1 + $0x524] sm:$0xf]
  %v447 = vld [vmem:[%s1 + $0x528] sm:$0xf]
  %v448 = vld [vmem:[%s1 + $0x52c] sm:$0xf]
  %v449 = vld [vmem:[%s1 + $0x530] sm:$0xf]
  %v450 = vld [vmem:[%s1 + $0x534] sm:$0xf]
  %v451 = vld [vmem:[%s1 + $0x538] sm:$0xf]
  %v452 = vld [vmem:[%s1 + $0x53c] sm:$0xf]
  %v453 = vld [vmem:[%s1 + $0x540] sm:$0xf]
  %v454 = vld [vmem:[%s1 + $0x544] sm:$0xf]
  %v455 = vld [vmem:[%s1 + $0x548] sm:$0xf]
  %v456 = vld [vmem:[%s1 + $0x54c] sm:$0xf]
  %v457 = vld [vmem:[%s1 + $0x550] sm:$0xf]
  %v458 = vld [vmem:[%s1 + $0x554] sm:$0xf]
  %v459 = vld [vmem:[%s1 + $0x558] sm:$0xf]
  %v460 = vld [vmem:[%s1 + $0x55c] sm:$0xf]
  %v461 = vld [vmem:[%s1 + $0x560] sm:$0xf]
  %v462 = vld [vmem:[%s1 + $0x564] sm:$0xf]
  %v463 = vld [vmem:[%s1 + $0x568] sm:$0xf]
  %v464 = vld [vmem:[%s1 + $0x56c] sm:$0xf]
  %v465 = vld [vmem:[%s1 + $0x570] sm:$0xf]
  %v466 = vld [vmem:[%s1 + $0x574] sm:$0xf]
  %v467 = vld [vmem:[%s1 + $0x578] sm:$0xf]
  %v468 = vld [vmem:[%s1 + $0x57c] sm:$0xf]
  %v469 = vld [vmem:[%s1 + $0x580] sm:$0xf]
  %v470 = vld [vmem:[%s1 + $0x584] sm:$0xf]
  %v471 = vld [vmem:[%s1 + $0x588] sm:$0xf]
  %v472 = vld [vmem:[%s1 + $0x58c] sm:$0xf]
  %v473 = vld [vmem:[%s1 + $0x590] sm:$0xf]
  %v474 = vld [vmem:[%s1 + $0x594] sm:$0xf]
  %v475 = vld [vmem:[%s1 + $0x598] sm:$0xf]
  %v476 = vld [vmem:[%s1 + $0x59c] sm:$0xf]
  %v477 = vld [vmem:[%s1 + $0x5a0] sm:$0xf]
  %v478 = vld [vmem:[%s1 + $0x5a4] sm:$0xf]
  %v479 = vld [vmem:[%s1 + $0x5a8] sm:$0xf]
  %v480 = vld [vmem:[%s1 + $0x5ac] sm:$0xf]
  %v481 = vld [vmem:[%s1 + $0x5b0] sm:$0xf]
  %v482 = vld [vmem:[%s1 + $0x5b4] sm:$0xf]
  %v483 = vld [vmem:[%s1 + $0x5b8] sm:$0xf]
  %v484 = vld [vmem:[%s1 + $0x5bc] sm:$0xf]
  %v485 = vld [vmem:[%s1 + $0x5c0] sm:$0xf]
  %v486 = vld [vmem:[%s1 + $0x5c4] sm:$0xf]
  %v487 = vld [vmem:[%s1 + $0x5c8] sm:$0xf]
  %v488 = vld [vmem:[%s1 + $0x5cc] sm:$0xf]
  %v489 = vld [vmem:[%s1 + $0x5d0] sm:$0xf]
  %v490 = vld [vmem:[%s1 + $0x5d4] sm:$0xf]
  %v491 = vld [vmem:[%s1 + $0x5d8] sm:$0xf]
  %v492 = vld [vmem:[%s1 + $0x5dc] sm:$0xf]
  %v493 = vld [vmem:[%s1 + $0x5e0] sm:$0xf]
  %v494 = vld [vmem:[%s1 + $0x5e4] sm:$0xf]
  %v495 = vld [vmem:[%s1 + $0x5e8] sm:$0xf]
  %v496 = vld [vmem:[%s1 + $0x5ec] sm:$0xf]
  %v497 = vld [vmem:[%s1 + $0x5f0] sm:$0xf]
  %v498 = vld [vmem:[%s1 + $0x5f4] sm:$0xf]
  %v499 = vld [vmem:[%s1 + $0x5f8] sm:$0xf]
  %v500 = vld [vmem:[%s1 + $0x5fc] sm:$0xf]
  %v501 = vld [vmem:[%s1 + $0x600] sm:$0xf]
  %v502 = vld [vmem:[%s1 + $0x604] sm:$0xf]
  %v503 = vld [vmem:[%s1 + $0x608] sm:$0xf]
  %v504 = vld [vmem:[%s1 + $0x60c] sm:$0xf]
  %v505 = vld [vmem:[%s1 + $0x610] sm:$0xf]
  %v506 = vld [vmem:[%s1 + $0x614] sm:$0xf]
  %v507 = vld [vmem:[%s1 + $0x618] sm:$0xf]
  %v508 = vld [vmem:[%s1 + $0x61c] sm:$0xf]
  %v509 = vld [vmem:[%s1 + $0x620] sm:$0xf]
  %v510 = vld [vmem:[%s1 + $0x624] sm:$0xf]
  %v511 = vld [vmem:[%s1 + $0x628] sm:$0xf]
  %v512 = vld [vmem:[%s1 + $0x62c] sm:$0xf]
  %v513 = vld [vmem:[%s1 + $0x630] sm:$0xf]
  %v514 = vld [vmem:[%s1 + $0x634] sm:$0xf]
  %v515 = vld [vmem:[%s1 + $0x638] sm:$0xf]
  %v516 = vld [vmem:[%s1 + $0x63c] sm:$0xf]
  %v517 = vld [vmem:[%s1 + $0x640] sm:$0xf]
  %v518 = vld [vmem:[%s1 + $0x644] sm:$0xf]
  %v519 = vld [vmem:[%s1 + $0x648] sm:$0xf]
  %v520 = vld [vmem:[%s1 + $0x64c] sm:$0xf]
  %v521 = vld [vmem:[%s1 + $0x650] sm:$0xf]
  %v522 = vld [vmem:[%s1 + $0x654] sm:$0xf]
  %v523 = vld [vmem:[%s1 + $0x658] sm:$0xf]
  %v524 = vld [vmem:[%s1 + $0x65c] sm:$0xf]
  %v525 = vld [vmem:[%s1 + $0x660] sm:$0xf]
  %v526 = vld [vmem:[%s1 + $0x664] sm:$0xf]
  %v527 = vld [vmem:[%s1 + $0x668] sm:$0xf]
  %v528 = vld [vmem:[%s1 + $0x66c] sm:$0xf]
  %v529 = vld [vmem:[%s1 + $0x670] sm:$0xf]
  %v530 = vld [vmem:[%s1 + $0x674] sm:$0xf]
  %v531 = vld [vmem:[%s1 + $0x678] sm:$0xf]
  %v532 = vld [vmem:[%s1 + $0x67c] sm:$0xf]
  %v533 = vld [vmem:[%s1 + $0x680] sm:$0xf]
  %v534 = vld [vmem:[%s1 + $0x684] sm:$0xf]
  %v535 = vld [vmem:[%s1 + $0x688] sm:$0xf]
  %v536 = vld [vmem:[%s1 + $0x68c] sm:$0xf]
  %v537 = vld [vmem:[%s1 + $0x690] sm:$0xf]
  %v538 = vld [vmem:[%s1 + $0x694] sm:$0xf]
  %v539 = vld [vmem:[%s1 + $0x698] sm:$0xf]
  %v540 = vld [vmem:[%s1 + $0x69c] sm:$0xf]
  %v541 = vld [vmem:[%s1 + $0x6a0] sm:$0xf]
  %v542 = vld [vmem:[%s1 + $0x6a4] sm:$0xf]
  %v543 = vld [vmem:[%s1 + $0x6a8] sm:$0xf]
  %v544 = vld [vmem:[%s1 + $0x6ac] sm:$0xf]
  %v545 = vld [vmem:[%s1 + $0x6b0] sm:$0xf]
  %v546 = vld [vmem:[%s1 + $0x6b4] sm:$0xf]
  %v547 = vld [vmem:[%s1 + $0x6b8] sm:$0xf]
  %v548 = vld [vmem:[%s1 + $0x6bc] sm:$0xf]
  %v549 = vld [vmem:[%s1 + $0x6c0] sm:$0xf]
  %v550 = vld [vmem:[%s1 + $0x6c4] sm:$0xf]
  %v551 = vld [vmem:[%s1 + $0x6c8] sm:$0xf]
  %v552 = vld [vmem:[%s1 + $0x6cc] sm:$0xf]
  %v553 = vld [vmem:[%s1 + $0x6d0] sm:$0xf]
  %v554 = vld [vmem:[%s1 + $0x6d4] sm:$0xf]
  %v555 = vld [vmem:[%s1 + $0x6d8] sm:$0xf]
  %v556 = vld [vmem:[%s1 + $0x6dc] sm:$0xf]
  %v557 = vld [vmem:[%s1 + $0x6e0] sm:$0xf]
  %v558 = vld [vmem:[%s1 + $0x6e4] sm:$0xf]
  %v559 = vld [vmem:[%s1 + $0x6e8] sm:$0xf]
  %v560 = vld [vmem:[%s1 + $0x6ec] sm:$0xf]
  %v561 = vld [vmem:[%s1 + $0x6f0] sm:$0xf]
  %v562 = vld [vmem:[%s1 + $0x6f4] sm:$0xf]
  %v563 = vld [vmem:[%s1 + $0x6f8] sm:$0xf]
  %v564 = vld [vmem:[%s1 + $0x6fc] sm:$0xf]
  %v565 = vld [vmem:[%s1 + $0x700] sm:$0xf]
  %v566 = vld [vmem:[%s1 + $0x704] sm:$0xf]
  %v567 = vld [vmem:[%s1 + $0x708] sm:$0xf]
  %v568 = vld [vmem:[%s1 + $0x70c] sm:$0xf]
  %v569 = vld [vmem:[%s1 + $0x710] sm:$0xf]
  %v570 = vld [vmem:[%s1 + $0x714] sm:$0xf]
  %v571 = vld [vmem:[%s1 + $0x718] sm:$0xf]
  %v572 = vld [vmem:[%s1 + $0x71c] sm:$0xf]
  %v573 = vld [vmem:[%s1 + $0x720] sm:$0xf]
  %v574 = vld [vmem:[%s1 + $0x724] sm:$0xf]
  %v575 = vld [vmem:[%s1 + $0x728] sm:$0xf]
  %v576 = vld [vmem:[%s1 + $0x72c] sm:$0xf]
  %v577 = vld [vmem:[%s1 + $0x730] sm:$0xf]
  %v578 = vld [vmem:[%s1 + $0x734] sm:$0xf]
  %v579 = vld [vmem:[%s1 + $0x738] sm:$0xf]
  %v580 = vld [vmem:[%s1 + $0x73c] sm:$0xf]
  %v581 = vld [vmem:[%s1 + $0x740] sm:$0xf]
  %v582 = vld [vmem:[%s1 + $0x744] sm:$0xf]
  %v583 = vld [vmem:[%s1 + $0x748] sm:$0xf]
  %v584 = vld [vmem:[%s1 + $0x74c] sm:$0xf]
  %v585 = vld [vmem:[%s1 + $0x750] sm:$0xf]
  %v586 = vld [vmem:[%s1 + $0x754] sm:$0xf]
  %v587 = vld [vmem:[%s1 + $0x758] sm:$0xf]
  %v588 = vld [vmem:[%s1 + $0x75c] sm:$0xf]
  %v589 = vld [vmem:[%s1 + $0x760] sm:$0xf]
  %v590 = vld [vmem:[%s1 + $0x764] sm:$0xf]
  %v591 = vld [vmem:[%s1 + $0x768] sm:$0xf]
  %v592 = vld [vmem:[%s1 + $0x76c] sm:$0xf]
  %v593 = vld [vmem:[%s1 + $0x770] sm:$0xf]
  %v594 = vld [vmem:[%s1 + $0x774] sm:$0xf]
  %v595 = vld [vmem:[%s1 + $0x778] sm:$0xf]
  %v596 = vld [vmem:[%s1 + $0x77c] sm:$0xf]
  %v597 = vld [vmem:[%s1 + $0x780] sm:$0xf]
  %v598 = vld [vmem:[%s1 + $0x784] sm:$0xf]
  %v599 = vld [vmem:[%s1 + $0x788] sm:$0xf]
  %v600 = vld [vmem:[%s1 + $0x78c] sm:$0xf]
  %v601 = vld [vmem:[%s1 + $0x790] sm:$0xf]
  %v602 = vld [vmem:[%s1 + $0x794] sm:$0xf]
  %v603 = vld [vmem:[%s1 + $0x798] sm:$0xf]
  %v604 = vld [vmem:[%s1 + $0x79c] sm:$0xf]
  %v605 = vld [vmem:[%s1 + $0x7a0] sm:$0xf]
  %v606 = vld [vmem:[%s1 + $0x7a4] sm:$0xf]
  %v607 = vld [vmem:[%s1 + $0x7a8] sm:$0xf]
  %v608 = vld [vmem:[%s1 + $0x7ac] sm:$0xf]
  %v609 = vld [vmem:[%s1 + $0x7b0] sm:$0xf]
  %v610 = vld [vmem:[%s1 + $0x7b4] sm:$0xf]
  %v611 = vld [vmem:[%s1 + $0x7b8] sm:$0xf]
  %v612 = vld [vmem:[%s1 + $0x7bc] sm:$0xf]
  %v613 = vld [vmem:[%s1 + $0x7c0] sm:$0xf]
  %v614 = vld [vmem:[%s1 + $0x7c4] sm:$0xf]
  %v615 = vld [vmem:[%s1 + $0x7c8] sm:$0xf]
  %v616 = vld [vmem:[%s1 + $0x7cc] sm:$0xf]
  %v617 = vld [vmem:[%s1 + $0x7d0] sm:$0xf]
  %v618 = vld [vmem:[%s1 + $0x7d4] sm:$0xf]
  %v619 = vld [vmem:[%s1 + $0x7d8] sm:$0xf]
  %v620 = vld [vmem:[%s1 + $0x7dc] sm:$0xf]
  %v621 = vld [vmem:[%s1 + $0x7e0] sm:$0xf]
  %v622 = vld [vmem:[%s1 + $0x7e4] sm:$0xf]
  %v623 = vld [vmem:[%s1 + $0x7e8] sm:$0xf]
  %v624 = vld [vmem:[%s1 + $0x7ec] sm:$0xf]
  %v625 = vld [vmem:[%s1 + $0x7f0] sm:$0xf]
  %v626 = vld [vmem:[%s1 + $0x7f4] sm:$0xf]
  %v627 = vld [vmem:[%s1 + $0x7f8] sm:$0xf]
  %v628 = vld [vmem:[%s1 + $0x7fc] sm:$0xf]
  %v629 = vld [vmem:[%s1 + $0x800] sm:$0xf]
  %v630 = vld [vmem:[%s1 + $0x804] sm:$0xf]
  %v631 = vld [vmem:[%s1 + $0x808] sm:$0xf]
  %v632 = vld [vmem:[%s1 + $0x80c] sm:$0xf]
  %v633 = vld [vmem:[%s1 + $0x810] sm:$0xf]
  %v634 = vld [vmem:[%s1 + $0x814] sm:$0xf]
  %v635 = vld [vmem:[%s1 + $0x818] sm:$0xf]
  %v636 = vld [vmem:[%s1 + $0x81c] sm:$0xf]
  %v637 = vld [vmem:[%s1 + $0x820] sm:$0xf]
  %v638 = vld [vmem:[%s1 + $0x824] sm:$0xf]
  %v639 = vld [vmem:[%s1 + $0x828] sm:$0xf]
  %v640 = vld [vmem:[%s1 + $0x82c] sm:$0xf]
  %v641 = vld [vmem:[%s1 + $0x830] sm:$0xf]
  %v642 = vld [vmem:[%s1 + $0x834] sm:$0xf]
  %v643 = vld [vmem:[%s1 + $0x838] sm:$0xf]
  %v644 = vld [vmem:[%s1 + $0x83c] sm:$0xf]
  %v645 = vld [vmem:[%s1 + $0x840] sm:$0xf]
  %v646 = vld [vmem:[%s1 + $0x844] sm:$0xf]
  %v647 = vld [vmem:[%s1 + $0x848] sm:$0xf]
  %v648 = vld [vmem:[%s1 + $0x84c] sm:$0xf]
  %v649 = vld [vmem:[%s1 + $0x850] sm:$0xf]
  %v650 = vld [vmem:[%s1 + $0x854] sm:$0xf]
  %v651 = vld [vmem:[%s1 + $0x858] sm:$0xf]
  %v652 = vld [vmem:[%s1 + $0x85c] sm:$0xf]
  %v653 = vld [vmem:[%s1 + $0x860] sm:$0xf]
  %v654 = vld [vmem:[%s1 + $0x864] sm:$0xf]
  %v655 = vld [vmem:[%s1 + $0x868] sm:$0xf]
  %v656 = vld [vmem:[%s1 + $0x86c] sm:$0xf]
  %v657 = vld [vmem:[%s1 + $0x870] sm:$0xf]
  %v658 = vld [vmem:[%s1 + $0x874] sm:$0xf]
  %v659 = vld [vmem:[%s1 + $0x878] sm:$0xf]
  %v660 = vld [vmem:[%s1 + $0x87c] sm:$0xf]
  %v661 = vld [vmem:[%s1 + $0x880] sm:$0xf]
  %v662 = vld [vmem:[%s1 + $0x884] sm:$0xf]
  %v663 = vld [vmem:[%s1 + $0x888] sm:$0xf]
  %v664 = vld [vmem:[%s1 + $0x88c] sm:$0xf]
  %v665 = vld [vmem:[%s1 + $0x890] sm:$0xf]
  %v666 = vld [vmem:[%s1 + $0x894] sm:$0xf]
  %v667 = vld [vmem:[%s1 + $0x898] sm:$0xf]
  %v668 = vld [vmem:[%s1 + $0x89c] sm:$0xf]
  %v669 = vld [vmem:[%s1 + $0x8a0] sm:$0xf]
  %v670 = vld [vmem:[%s1 + $0x8a4] sm:$0xf]
  %v671 = vld [vmem:[%s1 + $0x8a8] sm:$0xf]
  %v672 = vld [vmem:[%s1 + $0x8ac] sm:$0xf]
  %v673 = vld [vmem:[%s1 + $0x8b0] sm:$0xf]
  %v674 = vld [vmem:[%s1 + $0x8b4] sm:$0xf]
  %v675 = vld [vmem:[%s1 + $0x8b8] sm:$0xf]
  %v676 = vld [vmem:[%s1 + $0x8bc] sm:$0xf]
  %v677 = vld [vmem:[%s1 + $0x8c0] sm:$0xf]
  %v678 = vld [vmem:[%s1 + $0x8c4] sm:$0xf]
  %v679 = vld [vmem:[%s1 + $0x8c8] sm:$0xf]
  %v680 = vld [vmem:[%s1 + $0x8cc] sm:$0xf]
  %v681 = vld [vmem:[%s1 + $0x8d0] sm:$0xf]
  %v682 = vld [vmem:[%s1 + $0x8d4] sm:$0xf]
  %v683 = vld [vmem:[%s1 + $0x8d8] sm:$0xf]
  %v684 = vld [vmem:[%s1 + $0x8dc] sm:$0xf]
  %v685 = vld [vmem:[%s1 + $0x8e0] sm:$0xf]
  %v686 = vld [vmem:[%s1 + $0x8e4] sm:$0xf]
  %v687 = vld [vmem:[%s1 + $0x8e8] sm:$0xf]
  %v688 = vld [vmem:[%s1 + $0x8ec] sm:$0xf]
  %v689 = vld [vmem:[%s1 + $0x8f0] sm:$0xf]
  %v690 = vld [vmem:[%s1 + $0x8f4] sm:$0xf]
  %v691 = vld [vmem:[%s1 + $0x8f8] sm:$0xf]
  %v692 = vld [vmem:[%s1 + $0x8fc] sm:$0xf]
  %v693 = vld [vmem:[%s1 + $0x900] sm:$0xf]
  %v694 = vld [vmem:[%s1 + $0x904] sm:$0xf]
  %v695 = vld [vmem:[%s1 + $0x908] sm:$0xf]
  %v696 = vld [vmem:[%s1 + $0x90c] sm:$0xf]
  %v697 = vld [vmem:[%s1 + $0x910] sm:$0xf]
  %v698 = vld [vmem:[%s1 + $0x914] sm:$0xf]
  %v699 = vld [vmem:[%s1 + $0x918] sm:$0xf]
  %v700 = vld [vmem:[%s1 + $0x91c] sm:$0xf]
  %v701 = vld [vmem:[%s1 + $0x920] sm:$0xf]
  %v702 = vld [vmem:[%s1 + $0x924] sm:$0xf]
  %v703 = vld [vmem:[%s1 + $0x928] sm:$0xf]
  %v704 = vld [vmem:[%s1 + $0x92c] sm:$0xf]
  %v705 = vld [vmem:[%s1 + $0x930] sm:$0xf]
  %v706 = vld [vmem:[%s1 + $0x934] sm:$0xf]
  %v707 = vld [vmem:[%s1 + $0x938] sm:$0xf]
  %v708 = vld [vmem:[%s1 + $0x93c] sm:$0xf]
  %v709 = vld [vmem:[%s1 + $0x940] sm:$0xf]
  %v710 = vld [vmem:[%s1 + $0x944] sm:$0xf]
  %v711 = vld [vmem:[%s1 + $0x948] sm:$0xf]
  %v712 = vld [vmem:[%s1 + $0x94c] sm:$0xf]
  %v713 = vld [vmem:[%s1 + $0x950] sm:$0xf]
  %v714 = vld [vmem:[%s1 + $0x954] sm:$0xf]
  %v715 = vld [vmem:[%s1 + $0x958] sm:$0xf]
  %v716 = vld [vmem:[%s1 + $0x95c] sm:$0xf]
  %v717 = vld [vmem:[%s1 + $0x960] sm:$0xf]
  %v718 = vld [vmem:[%s1 + $0x964] sm:$0xf]
  %v719 = vld [vmem:[%s1 + $0x968] sm:$0xf]
  %v720 = vld [vmem:[%s1 + $0x96c] sm:$0xf]
  %v721 = vld [vmem:[%s1 + $0x970] sm:$0xf]
  %v722 = vld [vmem:[%s1 + $0x974] sm:$0xf]
  %v723 = vld [vmem:[%s1 + $0x978] sm:$0xf]
  %v724 = vld [vmem:[%s1 + $0x97c] sm:$0xf]
  %v725 = vld [vmem:[%s1 + $0x980] sm:$0xf]
  %v726 = vld [vmem:[%s1 + $0x984] sm:$0xf]
  %v727 = vld [vmem:[%s1 + $0x988] sm:$0xf]
  %v728 = vld [vmem:[%s1 + $0x98c] sm:$0xf]
  %v729 = vld [vmem:[%s1 + $0x990] sm:$0xf]
  %v730 = vld [vmem:[%s1 + $0x994] sm:$0xf]
  %v731 = vld [vmem:[%s1 + $0x998] sm:$0xf]
  %v732 = vld [vmem:[%s1 + $0x99c] sm:$0xf]
  %v733 = vld [vmem:[%s1 + $0x9a0] sm:$0xf]
  %v734 = vld [vmem:[%s1 + $0x9a4] sm:$0xf]
  %v735 = vld [vmem:[%s1 + $0x9a8] sm:$0xf]
  %v736 = vld [vmem:[%s1 + $0x9ac] sm:$0xf]
  %v737 = vld [vmem:[%s1 + $0x9b0] sm:$0xf]
  %v738 = vld [vmem:[%s1 + $0x9b4] sm:$0xf]
  %v739 = vld [vmem:[%s1 + $0x9b8] sm:$0xf]
  %v740 = vld [vmem:[%s1 + $0x9bc] sm:$0xf]
  %v741 = vld [vmem:[%s1 + $0x9c0] sm:$0xf]
  %v742 = vld [vmem:[%s1 + $0x9c4] sm:$0xf]
  %v743 = vld [vmem:[%s1 + $0x9c8] sm:$0xf]
  %v744 = vld [vmem:[%s1 + $0x9cc] sm:$0xf]
  %v745 = vld [vmem:[%s1 + $0x9d0] sm:$0xf]
  %v746 = vld [vmem:[%s1 + $0x9d4] sm:$0xf]
  %v747 = vld [vmem:[%s1 + $0x9d8] sm:$0xf]
  %v748 = vld [vmem:[%s1 + $0x9dc] sm:$0xf]
  %v749 = vld [vmem:[%s1 + $0x9e0] sm:$0xf]
  %v750 = vld [vmem:[%s1 + $0x9e4] sm:$0xf]
  %v751 = vld [vmem:[%s1 + $0x9e8] sm:$0xf]
  %v752 = vld [vmem:[%s1 + $0x9ec] sm:$0xf]
  %v753 = vld [vmem:[%s1 + $0x9f0] sm:$0xf]
  %v754 = vld [vmem:[%s1 + $0x9f4] sm:$0xf]
  %v755 = vld [vmem:[%s1 + $0x9f8] sm:$0xf]
  %v756 = vld [vmem:[%s1 + $0x9fc] sm:$0xf]
  %v757 = vld [vmem:[%s1 + $0xa00] sm:$0xf]
  %v758 = vld [vmem:[%s1 + $0xa04] sm:$0xf]
  %v759 = vld [vmem:[%s1 + $0xa08] sm:$0xf]
  %v760 = vld [vmem:[%s1 + $0xa0c] sm:$0xf]
  %v761 = vld [vmem:[%s1 + $0xa10] sm:$0xf]
  %v762 = vld [vmem:[%s1 + $0xa14] sm:$0xf]
  %v763 = vld [vmem:[%s1 + $0xa18] sm:$0xf]
  %v764 = vld [vmem:[%s1 + $0xa1c] sm:$0xf]
  %v765 = vld [vmem:[%s1 + $0xa20] sm:$0xf]
  %v766 = vld [vmem:[%s1 + $0xa24] sm:$0xf]
  %v767 = vld [vmem:[%s1 + $0xa28] sm:$0xf]
  %v768 = vld [vmem:[%s1 + $0xa2c] sm:$0xf]
  %v769 = vld [vmem:[%s1 + $0xa30] sm:$0xf]
  %v770 = vld [vmem:[%s1 + $0xa34] sm:$0xf]
  %v771 = vld [vmem:[%s1 + $0xa38] sm:$0xf]
  %v772 = vld [vmem:[%s1 + $0xa3c] sm:$0xf]
  %v773 = vld [vmem:[%s1 + $0xa40] sm:$0xf]
  %v774 = vld [vmem:[%s1 + $0xa44] sm:$0xf]
  %v775 = vld [vmem:[%s1 + $0xa48] sm:$0xf]
  %v776 = vld [vmem:[%s1 + $0xa4c] sm:$0xf]
  %v777 = vld [vmem:[%s1 + $0xa50] sm:$0xf]
  %v778 = vld [vmem:[%s1 + $0xa54] sm:$0xf]
  %v779 = vld [vmem:[%s1 + $0xa58] sm:$0xf]
  %v780 = vld [vmem:[%s1 + $0xa5c] sm:$0xf]
  %v781 = vld [vmem:[%s1 + $0xa60] sm:$0xf]
  %v782 = vld [vmem:[%s1 + $0xa64] sm:$0xf]
  %v783 = vld [vmem:[%s1 + $0xa68] sm:$0xf]
  %v784 = vld [vmem:[%s1 + $0xa6c] sm:$0xf]
  %v785 = vld [vmem:[%s1 + $0xa70] sm:$0xf]
  %v786 = vld [vmem:[%s1 + $0xa74] sm:$0xf]
  %v787 = vld [vmem:[%s1 + $0xa78] sm:$0xf]
  %v788 = vld [vmem:[%s1 + $0xa7c] sm:$0xf]
  %v789 = vld [vmem:[%s1 + $0xa80] sm:$0xf]
  %v790 = vld [vmem:[%s1 + $0xa84] sm:$0xf]
  %v791 = vld [vmem:[%s1 + $0xa88] sm:$0xf]
  %v792 = vld [vmem:[%s1 + $0xa8c] sm:$0xf]
  %v793 = vld [vmem:[%s1 + $0xa90] sm:$0xf]
  %v794 = vld [vmem:[%s1 + $0xa94] sm:$0xf]
  %v795 = vld [vmem:[%s1 + $0xa98] sm:$0xf]
  %v796 = vld [vmem:[%s1 + $0xa9c] sm:$0xf]
  %v797 = vld [vmem:[%s1 + $0xaa0] sm:$0xf]
  %v798 = vld [vmem:[%s1 + $0xaa4] sm:$0xf]
  %v799 = vld [vmem:[%s1 + $0xaa8] sm:$0xf]
  %v800 = vld [vmem:[%s1 + $0xaac] sm:$0xf]
  %v801 = vld [vmem:[%s1 + $0xab0] sm:$0xf]
  %v802 = vld [vmem:[%s1 + $0xab4] sm:$0xf]
  %v803 = vld [vmem:[%s1 + $0xab8] sm:$0xf]
  %v804 = vld [vmem:[%s1 + $0xabc] sm:$0xf]
  %v805 = vld [vmem:[%s1 + $0xac0] sm:$0xf]
  %v806 = vld [vmem:[%s1 + $0xac4] sm:$0xf]
  %v807 = vld [vmem:[%s1 + $0xac8] sm:$0xf]
  %v808 = vld [vmem:[%s1 + $0xacc] sm:$0xf]
  %v809 = vld [vmem:[%s1 + $0xad0] sm:$0xf]
  %v810 = vld [vmem:[%s1 + $0xad4] sm:$0xf]
  %v811 = vld [vmem:[%s1 + $0xad8] sm:$0xf]
  %v812 = vld [vmem:[%s1 + $0xadc] sm:$0xf]
  %v813 = vld [vmem:[%s1 + $0xae0] sm:$0xf]
  %v814 = vld [vmem:[%s1 + $0xae4] sm:$0xf]
  %v815 = vld [vmem:[%s1 + $0xae8] sm:$0xf]
  %v816 = vld [vmem:[%s1 + $0xaec] sm:$0xf]
  %v817 = vld [vmem:[%s1 + $0xaf0] sm:$0xf]
  %v818 = vld [vmem:[%s1 + $0xaf4] sm:$0xf]
  %v819 = vld [vmem:[%s1 + $0xaf8] sm:$0xf]
  %v820 = vld [vmem:[%s1 + $0xafc] sm:$0xf]
  %v821 = vld [vmem:[%s1 + $0xb00] sm:$0xf]
  %v822 = vld [vmem:[%s1 + $0xb04] sm:$0xf]
  %v823 = vld [vmem:[%s1 + $0xb08] sm:$0xf]
  %v824 = vld [vmem:[%s1 + $0xb0c] sm:$0xf]
  %v825 = vld [vmem:[%s1 + $0xb10] sm:$0xf]
  %v826 = vld [vmem:[%s1 + $0xb14] sm:$0xf]
  %v827 = vld [vmem:[%s1 + $0xb18] sm:$0xf]
  %v828 = vld [vmem:[%s1 + $0xb1c] sm:$0xf]
  %v829 = vld [vmem:[%s1 + $0xb20] sm:$0xf]
  %v830 = vld [vmem:[%s1 + $0xb24] sm:$0xf]
  %v831 = vld [vmem:[%s1 + $0xb28] sm:$0xf]
  %v832 = vld [vmem:[%s1 + $0xb2c] sm:$0xf]
  %v833 = vld [vmem:[%s1 + $0xb30] sm:$0xf]
  %v834 = vld [vmem:[%s1 + $0xb34] sm:$0xf]
  %v835 = vld [vmem:[%s1 + $0xb38] sm:$0xf]
  %v836 = vld [vmem:[%s1 + $0xb3c] sm:$0xf]
  %v837 = vld [vmem:[%s1 + $0xb40] sm:$0xf]
  %v838 = vld [vmem:[%s1 + $0xb44] sm:$0xf]
  %v839 = vld [vmem:[%s1 + $0xb48] sm:$0xf]
  %v840 = vld [vmem:[%s1 + $0xb4c] sm:$0xf]
  %v841 = vld [vmem:[%s1 + $0xb50] sm:$0xf]
  %v842 = vld [vmem:[%s1 + $0xb54] sm:$0xf]
  %v843 = vld [vmem:[%s1 + $0xb58] sm:$0xf]
  %v844 = vld [vmem:[%s1 + $0xb5c] sm:$0xf]
  %v845 = vld [vmem:[%s1 + $0xb60] sm:$0xf]
  %v846 = vld [vmem:[%s1 + $0xb64] sm:$0xf]
  %v847 = vld [vmem:[%s1 + $0xb68] sm:$0xf]
  %v848 = vld [vmem:[%s1 + $0xb6c] sm:$0xf]
  %v849 = vld [vmem:[%s1 + $0xb70] sm:$0xf]
  %v850 = vld [vmem:[%s1 + $0xb74] sm:$0xf]
  %v851 = vld [vmem:[%s1 + $0xb78] sm:$0xf]
  %v852 = vld [vmem:[%s1 + $0xb7c] sm:$0xf]
  %v853 = vld [vmem:[%s1 + $0xb80] sm:$0xf]
  %v854 = vld [vmem:[%s1 + $0xb84] sm:$0xf]
  %v855 = vld [vmem:[%s1 + $0xb88] sm:$0xf]
  %v856 = vld [vmem:[%s1 + $0xb8c] sm:$0xf]
  %v857 = vld [vmem:[%s1 + $0xb90] sm:$0xf]
  %v858 = vld [vmem:[%s1 + $0xb94] sm:$0xf]
  %v859 = vld [vmem:[%s1 + $0xb98] sm:$0xf]
  %v860 = vld [vmem:[%s1 + $0xb9c] sm:$0xf]
  %v861 = vld [vmem:[%s1 + $0xba0] sm:$0xf]
  %v862 = vld [vmem:[%s1 + $0xba4] sm:$0xf]
  %v863 = vld [vmem:[%s1 + $0xba8] sm:$0xf]
  %v864 = vld [vmem:[%s1 + $0xbac] sm:$0xf]
  %v865 = vld [vmem:[%s1 + $0xbb0] sm:$0xf]
  %v866 = vld [vmem:[%s1 + $0xbb4] sm:$0xf]
  %v867 = vld [vmem:[%s1 + $0xbb8] sm:$0xf]
  %v868 = vld [vmem:[%s1 + $0xbbc] sm:$0xf]
  %v869 = vld [vmem:[%s1 + $0xbc0] sm:$0xf]
  %v870 = vld [vmem:[%s1 + $0xbc4] sm:$0xf]
  %v871 = vld [vmem:[%s1 + $0xbc8] sm:$0xf]
  %v872 = vld [vmem:[%s1 + $0xbcc] sm:$0xf]
  %v873 = vld [vmem:[%s1 + $0xbd0] sm:$0xf]
  %v874 = vld [vmem:[%s1 + $0xbd4] sm:$0xf]
  %v875 = vld [vmem:[%s1 + $0xbd8] sm:$0xf]
  %v876 = vld [vmem:[%s1 + $0xbdc] sm:$0xf]
  %v877 = vld [vmem:[%s1 + $0xbe0] sm:$0xf]
  %v878 = vld [vmem:[%s1 + $0xbe4] sm:$0xf]
  %v879 = vld [vmem:[%s1 + $0xbe8] sm:$0xf]
  %v880 = vld [vmem:[%s1 + $0xbec] sm:$0xf]
  %v881 = vld [vmem:[%s1 + $0xbf0] sm:$0xf]
  %v882 = vld [vmem:[%s1 + $0xbf4] sm:$0xf]
  %v883 = vld [vmem:[%s1 + $0xbf8] sm:$0xf]
  %v884 = vld [vmem:[%s1 + $0xbfc] sm:$0xf]
  %v885 = vld [vmem:[%s1 + $0xc00] sm:$0xf]
  %v886 = vld [vmem:[%s1 + $0xc04] sm:$0xf]
  %v887 = vld [vmem:[%s1 + $0xc08] sm:$0xf]
  %v888 = vld [vmem:[%s1 + $0xc0c] sm:$0xf]
  %v889 = vld [vmem:[%s1 + $0xc10] sm:$0xf]
  %v890 = vld [vmem:[%s1 + $0xc14] sm:$0xf]
  %v891 = vld [vmem:[%s1 + $0xc18] sm:$0xf]
  %v892 = vld [vmem:[%s1 + $0xc1c] sm:$0xf]
  %v893 = vld [vmem:[%s1 + $0xc20] sm:$0xf]
  %v894 = vld [vmem:[%s1 + $0xc24] sm:$0xf]
  %v895 = vld [vmem:[%s1 + $0xc28] sm:$0xf]
  %v896 = vld [vmem:[%s1 + $0xc2c] sm:$0xf]
  %v897 = vld [vmem:[%s1 + $0xc30] sm:$0xf]
  %v898 = vld [vmem:[%s1 + $0xc34] sm:$0xf]
  %v899 = vld [vmem:[%s1 + $0xc38] sm:$0xf]
  %v900 = vld [vmem:[%s1 + $0xc3c] sm:$0xf]
  %v901 = vld [vmem:[%s1 + $0xc40] sm:$0xf]
  %v902 = vld [vmem:[%s1 + $0xc44] sm:$0xf]
  %v903 = vld [vmem:[%s1 + $0xc48] sm:$0xf]
  %v904 = vld [vmem:[%s1 + $0xc4c] sm:$0xf]
  %v905 = vld [vmem:[%s1 + $0xc50] sm:$0xf]
  %v906 = vld [vmem:[%s1 + $0xc54] sm:$0xf]
  %v907 = vld [vmem:[%s1 + $0xc58] sm:$0xf]
  %v908 = vld [vmem:[%s1 + $0xc5c] sm:$0xf]
  %v909 = vld [vmem:[%s1 + $0xc60] sm:$0xf]
  %v910 = vld [vmem:[%s1 + $0xc64] sm:$0xf]
  %v911 = vld [vmem:[%s1 + $0xc68] sm:$0xf]
  %v912 = vld [vmem:[%s1 + $0xc6c] sm:$0xf]
  %v913 = vld [vmem:[%s1 + $0xc70] sm:$0xf]
  %v914 = vld [vmem:[%s1 + $0xc74] sm:$0xf]
  %v915 = vld [vmem:[%s1 + $0xc78] sm:$0xf]
  %v916 = vld [vmem:[%s1 + $0xc7c] sm:$0xf]
  %v917 = vld [vmem:[%s1 + $0xc80] sm:$0xf]
  %v918 = vld [vmem:[%s1 + $0xc84] sm:$0xf]
  %v919 = vld [vmem:[%s1 + $0xc88] sm:$0xf]
  %v920 = vld [vmem:[%s1 + $0xc8c] sm:$0xf]
  %v921 = vld [vmem:[%s1 + $0xc90] sm:$0xf]
  %v922 = vld [vmem:[%s1 + $0xc94] sm:$0xf]
  %v923 = vld [vmem:[%s1 + $0xc98] sm:$0xf]
  %v924 = vld [vmem:[%s1 + $0xc9c] sm:$0xf]
  %v925 = vld [vmem:[%s1 + $0xca0] sm:$0xf]
  %v926 = vld [vmem:[%s1 + $0xca4] sm:$0xf]
  %v927 = vld [vmem:[%s1 + $0xca8] sm:$0xf]
  %v928 = vld [vmem:[%s1 + $0xcac] sm:$0xf]
  %v929 = vld [vmem:[%s1 + $0xcb0] sm:$0xf]
  %v930 = vld [vmem:[%s1 + $0xcb4] sm:$0xf]
  %v931 = vld [vmem:[%s1 + $0xcb8] sm:$0xf]
  %v932 = vld [vmem:[%s1 + $0xcbc] sm:$0xf]
  %v933 = vld [vmem:[%s1 + $0xcc0] sm:$0xf]
  %v934 = vld [vmem:[%s1 + $0xcc4] sm:$0xf]
  %v935 = vld [vmem:[%s1 + $0xcc8] sm:$0xf]
  %v936 = vld [vmem:[%s1 + $0xccc] sm:$0xf]
  %v937 = vld [vmem:[%s1 + $0xcd0] sm:$0xf]
  %v938 = vld [vmem:[%s1 + $0xcd4] sm:$0xf]
  %v939 = vld [vmem:[%s1 + $0xcd8] sm:$0xf]
  %v940 = vld [vmem:[%s1 + $0xcdc] sm:$0xf]
  %v941 = vld [vmem:[%s1 + $0xce0] sm:$0xf]
  %v942 = vld [vmem:[%s1 + $0xce4] sm:$0xf]
  %v943 = vld [vmem:[%s1 + $0xce8] sm:$0xf]
  %v944 = vld [vmem:[%s1 + $0xcec] sm:$0xf]
  %v945 = vld [vmem:[%s1 + $0xcf0] sm:$0xf]
  %v946 = vld [vmem:[%s1 + $0xcf4] sm:$0xf]
  %v947 = vld [vmem:[%s1 + $0xcf8] sm:$0xf]
  %v948 = vld [vmem:[%s1 + $0xcfc] sm:$0xf]
  %v949 = vld [vmem:[%s1 + $0xd00] sm:$0xf]
  %v950 = vld [vmem:[%s1 + $0xd04] sm:$0xf]
  %v951 = vld [vmem:[%s1 + $0xd08] sm:$0xf]
  %v952 = vld [vmem:[%s1 + $0xd0c] sm:$0xf]
  %v953 = vld [vmem:[%s1 + $0xd10] sm:$0xf]
  %v954 = vld [vmem:[%s1 + $0xd14] sm:$0xf]
  %v955 = vld [vmem:[%s1 + $0xd18] sm:$0xf]
  %v956 = vld [vmem:[%s1 + $0xd1c] sm:$0xf]
  %v957 = vld [vmem:[%s1 + $0xd20] sm:$0xf]
  %v958 = vld [vmem:[%s1 + $0xd24] sm:$0xf]
  %v959 = vld [vmem:[%s1 + $0xd28] sm:$0xf]
  %v960 = vld [vmem:[%s1 + $0xd2c] sm:$0xf]
  %v961 = vld [vmem:[%s1 + $0xd30] sm:$0xf]
  %v962 = vld [vmem:[%s1 + $0xd34] sm:$0xf]
  %v963 = vld [vmem:[%s1 + $0xd38] sm:$0xf]
  %v964 = vld [vmem:[%s1 + $0xd3c] sm:$0xf]
  %v965 = vld [vmem:[%s1 + $0xd40] sm:$0xf]
  %v966 = vld [vmem:[%s1 + $0xd44] sm:$0xf]
  %v967 = vld [vmem:[%s1 + $0xd48] sm:$0xf]
  %v968 = vld [vmem:[%s1 + $0xd4c] sm:$0xf]
  %v969 = vld [vmem:[%s1 + $0xd50] sm:$0xf]
  %v970 = vld [vmem:[%s1 + $0xd54] sm:$0xf]
  %v971 = vld [vmem:[%s1 + $0xd58] sm:$0xf]
  %v972 = vld [vmem:[%s1 + $0xd5c] sm:$0xf]
  %v973 = vld [vmem:[%s1 + $0xd60] sm:$0xf]
  %v974 = vld [vmem:[%s1 + $0xd64] sm:$0xf]
  %v975 = vld [vmem:[%s1 + $0xd68] sm:$0xf]
  %v976 = vld [vmem:[%s1 + $0xd6c] sm:$0xf]
  %v977 = vld [vmem:[%s1 + $0xd70] sm:$0xf]
  %v978 = vld [vmem:[%s1 + $0xd74] sm:$0xf]
  %v979 = vld [vmem:[%s1 + $0xd78] sm:$0xf]
  %v980 = vld [vmem:[%s1 + $0xd7c] sm:$0xf]
  %v981 = vld [vmem:[%s1 + $0xd80] sm:$0xf]
  %v982 = vld [vmem:[%s1 + $0xd84] sm:$0xf]
  %v983 = vld [vmem:[%s1 + $0xd88] sm:$0xf]
  %v984 = vld [vmem:[%s1 + $0xd8c] sm:$0xf]
  %v985 = vld [vmem:[%s1 + $0xd90] sm:$0xf]
  %v986 = vld [vmem:[%s1 + $0xd94] sm:$0xf]
  %v987 = vld [vmem:[%s1 + $0xd98] sm:$0xf]
  %v988 = vld [vmem:[%s1 + $0xd9c] sm:$0xf]
  %v989 = vld [vmem:[%s1 + $0xda0] sm:$0xf]
  %v990 = vld [vmem:[%s1 + $0xda4] sm:$0xf]
  %v991 = vld [vmem:[%s1 + $0xda8] sm:$0xf]
  %v992 = vld [vmem:[%s1 + $0xdac] sm:$0xf]
  %v993 = vld [vmem:[%s1 + $0xdb0] sm:$0xf]
  %v994 = vld [vmem:[%s1 + $0xdb4] sm:$0xf]
  %v995 = vld [vmem:[%s1 + $0xdb8] sm:$0xf]
  %v996 = vld [vmem:[%s1 + $0xdbc] sm:$0xf]
  %v997 = vld [vmem:[%s1 + $0xdc0] sm:$0xf]
  %v998 = vld [vmem:[%s1 + $0xdc4] sm:$0xf]
  %v999 = vld [vmem:[%s1 + $0xdc8] sm:$0xf]
  %v1000 = vld [vmem:[%s1 + $0xdcc] sm:$0xf]
  %v1001 = vld [vmem:[%s1 + $0xdd0] sm:$0xf]
  %v1002 = vld [vmem:[%s1 + $0xdd4] sm:$0xf]
  %v1003 = vld [vmem:[%s1 + $0xdd8] sm:$0xf]
  %v1004 = vld [vmem:[%s1 + $0xddc] sm:$0xf]
  %v1005 = vld [vmem:[%s1 + $0xde0] sm:$0xf]
  %v1006 = vld [vmem:[%s1 + $0xde4] sm:$0xf]
  %v1007 = vld [vmem:[%s1 + $0xde8] sm:$0xf]
  %v1008 = vld [vmem:[%s1 + $0xdec] sm:$0xf]
  %v1009 = vld [vmem:[%s1 + $0xdf0] sm:$0xf]
  %v1010 = vld [vmem:[%s1 + $0xdf4] sm:$0xf]
  %v1011 = vld [vmem:[%s1 + $0xdf8] sm:$0xf]
  %v1012 = vld [vmem:[%s1 + $0xdfc] sm:$0xf]
  %v1013 = vld [vmem:[%s1 + $0xe00] sm:$0xf]
  %v1014 = vld [vmem:[%s1 + $0xe04] sm:$0xf]
  %v1015 = vld [vmem:[%s1 + $0xe08] sm:$0xf]
  %v1016 = vld [vmem:[%s1 + $0xe0c] sm:$0xf]
  %v1017 = vld [vmem:[%s1 + $0xe10] sm:$0xf]
  %v1018 = vld [vmem:[%s1 + $0xe14] sm:$0xf]
  %v1019 = vld [vmem:[%s1 + $0xe18] sm:$0xf]
  %v1020 = vld [vmem:[%s1 + $0xe1c] sm:$0xf]
  %v1021 = vld [vmem:[%s1 + $0xe20] sm:$0xf]
  %v1022 = vld [vmem:[%s1 + $0xe24] sm:$0xf]
  %v1023 = vld [vmem:[%s1 + $0xe28] sm:$0xf]
  %v1024 = vld [vmem:[%s1 + $0xe2c] sm:$0xf]
  %v1025 = vld [vmem:[%s1 + $0xe30] sm:$0xf]
  %v1026 = vld [vmem:[%s1 + $0xe34] sm:$0xf]
  %v1027 = vld [vmem:[%s1 + $0xe38] sm:$0xf]
  %v1028 = vld [vmem:[%s1 + $0xe3c] sm:$0xf]
  %v1029 = vld [vmem:[%s1 + $0xe40] sm:$0xf]
  %v1030 = vld [vmem:[%s1 + $0xe44] sm:$0xf]
  %v1031 = vld [vmem:[%s1 + $0xe48] sm:$0xf]
  %v1032 = vld [vmem:[%s1 + $0xe4c] sm:$0xf]
  %v1033 = vld [vmem:[%s1 + $0xe50] sm:$0xf]
  %v1034 = vld [vmem:[%s1 + $0xe54] sm:$0xf]
  %v1035 = vld [vmem:[%s1 + $0xe58] sm:$0xf]
  %v1036 = vld [vmem:[%s1 + $0xe5c] sm:$0xf]
  %v1037 = vld [vmem:[%s1 + $0xe60] sm:$0xf]
  %v1038 = vld [vmem:[%s1 + $0xe64] sm:$0xf]
  %v1039 = vld [vmem:[%s1 + $0xe68] sm:$0xf]
  %v1040 = vld [vmem:[%s1 + $0xe6c] sm:$0xf]
  %v1041 = vld [vmem:[%s1 + $0xe70] sm:$0xf]
  %v1042 = vld [vmem:[%s1 + $0xe74] sm:$0xf]
  %v1043 = vld [vmem:[%s1 + $0xe78] sm:$0xf]
  %v1044 = vld [vmem:[%s1 + $0xe7c] sm:$0xf]
  %v1045 = vld [vmem:[%s1 + $0xe80] sm:$0xf]
  %v1046 = vld [vmem:[%s1 + $0xe84] sm:$0xf]
  %v1047 = vld [vmem:[%s1 + $0xe88] sm:$0xf]
  %v1048 = vld [vmem:[%s1 + $0xe8c] sm:$0xf]
  %v1049 = vld [vmem:[%s1 + $0xe90] sm:$0xf]
  %v1050 = vld [vmem:[%s1 + $0xe94] sm:$0xf]
  %v1051 = vld [vmem:[%s1 + $0xe98] sm:$0xf]
  %v1052 = vld [vmem:[%s1 + $0xe9c] sm:$0xf]
  %v1053 = vld [vmem:[%s1 + $0xea0] sm:$0xf]
  %v1054 = vld [vmem:[%s1 + $0xea4] sm:$0xf]
  %v1055 = vld [vmem:[%s1 + $0xea8] sm:$0xf]
  %v1056 = vld [vmem:[%s1 + $0xeac] sm:$0xf]
  %v1057 = vld [vmem:[%s1 + $0xeb0] sm:$0xf]
  %v1058 = vld [vmem:[%s1 + $0xeb4] sm:$0xf]
  %v1059 = vld [vmem:[%s1 + $0xeb8] sm:$0xf]
  %v1060 = vld [vmem:[%s1 + $0xebc] sm:$0xf]
  %v1061 = vld [vmem:[%s1 + $0xec0] sm:$0xf]
  %v1062 = vld [vmem:[%s1 + $0xec4] sm:$0xf]
  %v1063 = vld [vmem:[%s1 + $0xec8] sm:$0xf]
  %v1064 = vld [vmem:[%s1 + $0xecc] sm:$0xf]
  %v1065 = vld [vmem:[%s1 + $0xed0] sm:$0xf]
  %v1066 = vld [vmem:[%s1 + $0xed4] sm:$0xf]
  %v1067 = vld [vmem:[%s1 + $0xed8] sm:$0xf]
  %v1068 = vld [vmem:[%s1 + $0xedc] sm:$0xf]
  %v1069 = vld [vmem:[%s1 + $0xee0] sm:$0xf]
  %v1070 = vld [vmem:[%s1 + $0xee4] sm:$0xf]
  %v1071 = vld [vmem:[%s1 + $0xee8] sm:$0xf]
  %v1072 = vld [vmem:[%s1 + $0xeec] sm:$0xf]
  %v1073 = vld [vmem:[%s1 + $0xef0] sm:$0xf]
  %v1074 = vld [vmem:[%s1 + $0xef4] sm:$0xf]
  %v1075 = vld [vmem:[%s1 + $0xef8] sm:$0xf]
  %v1076 = vld [vmem:[%s1 + $0xefc] sm:$0xf]
  %v1077 = vld [vmem:[%s1 + $0xf00] sm:$0xf]
  %v1078 = vld [vmem:[%s1 + $0xf04] sm:$0xf]
  %v1079 = vld [vmem:[%s1 + $0xf08] sm:$0xf]
  %v1080 = vld [vmem:[%s1 + $0xf0c] sm:$0xf]
  %v1081 = vld [vmem:[%s1 + $0xf10] sm:$0xf]
  %v1082 = vld [vmem:[%s1 + $0xf14] sm:$0xf]
  %v1083 = vld [vmem:[%s1 + $0xf18] sm:$0xf]
  %v1084 = vld [vmem:[%s1 + $0xf1c] sm:$0xf]
  %v1085 = vld [vmem:[%s1 + $0xf20] sm:$0xf]
  %v1086 = vld [vmem:[%s1 + $0xf24] sm:$0xf]
  %v1087 = vld [vmem:[%s1 + $0xf28] sm:$0xf]
  %v1088 = vld [vmem:[%s1 + $0xf2c] sm:$0xf]
  %v1089 = vld [vmem:[%s1 + $0xf30] sm:$0xf]
  %v1090 = vld [vmem:[%s1 + $0xf34] sm:$0xf]
  %v1091 = vld [vmem:[%s1 + $0xf38] sm:$0xf]
  %v1092 = vld [vmem:[%s1 + $0xf3c] sm:$0xf]
  %v1093 = vld [vmem:[%s1 + $0xf40] sm:$0xf]
  %v1094 = vld [vmem:[%s1 + $0xf44] sm:$0xf]
  %v1095 = vld [vmem:[%s1 + $0xf48] sm:$0xf]
  %v1096 = vld [vmem:[%s1 + $0xf4c] sm:$0xf]
  %v1097 = vld [vmem:[%s1 + $0xf50] sm:$0xf]
  %v1098 = vld [vmem:[%s1 + $0xf54] sm:$0xf]
  %v1099 = vld [vmem:[%s1 + $0xf58] sm:$0xf]
  %v1100 = vld [vmem:[%s1 + $0xf5c] sm:$0xf]
  %v1101 = vld [vmem:[%s1 + $0xf60] sm:$0xf]
  %v1102 = vld [vmem:[%s1 + $0xf64] sm:$0xf]
  %v1103 = vld [vmem:[%s1 + $0xf68] sm:$0xf]
  %v1104 = vld [vmem:[%s1 + $0xf6c] sm:$0xf]
  %v1105 = vld [vmem:[%s1 + $0xf70] sm:$0xf]
  %v1106 = vld [vmem:[%s1 + $0xf74] sm:$0xf]
  %v1107 = vld [vmem:[%s1 + $0xf78] sm:$0xf]
  %v1108 = vld [vmem:[%s1 + $0xf7c] sm:$0xf]
  %v1109 = vld [vmem:[%s1 + $0xf80] sm:$0xf]
  %v1110 = vld [vmem:[%s1 + $0xf84] sm:$0xf]
  %v1111 = vld [vmem:[%s1 + $0xf88] sm:$0xf]
  %v1112 = vld [vmem:[%s1 + $0xf8c] sm:$0xf]
  %v1113 = vld [vmem:[%s1 + $0xf90] sm:$0xf]
  %v1114 = vld [vmem:[%s1 + $0xf94] sm:$0xf]
  %v1115 = vld [vmem:[%s1 + $0xf98] sm:$0xf]
  %v1116 = vld [vmem:[%s1 + $0xf9c] sm:$0xf]
  %v1117 = vld [vmem:[%s1 + $0xfa0] sm:$0xf]
  %v1118 = vld [vmem:[%s1 + $0xfa4] sm:$0xf]
  %v1119 = vld [vmem:[%s1 + $0xfa8] sm:$0xf]
  %v1120 = vld [vmem:[%s1 + $0xfac] sm:$0xf]
  %v1121 = vld [vmem:[%s1 + $0xfb0] sm:$0xf]
  %v1122 = vld [vmem:[%s1 + $0xfb4] sm:$0xf]
  %v1123 = vld [vmem:[%s1 + $0xfb8] sm:$0xf]
  %v1124 = vld [vmem:[%s1 + $0xfbc] sm:$0xf]
  %v1125 = vld [vmem:[%s1 + $0xfc0] sm:$0xf]
  %v1126 = vld [vmem:[%s1 + $0xfc4] sm:$0xf]
  %v1127 = vld [vmem:[%s1 + $0xfc8] sm:$0xf]
  %v1128 = vld [vmem:[%s1 + $0xfcc] sm:$0xf]
  %v1129 = vld [vmem:[%s1 + $0xfd0] sm:$0xf]
  %v1130 = vld [vmem:[%s1 + $0xfd4] sm:$0xf]
  %v1131 = vld [vmem:[%s1 + $0xfd8] sm:$0xf]
  %v1132 = vld [vmem:[%s1 + $0xfdc] sm:$0xf]
  %v1133 = vld [vmem:[%s1 + $0xfe0] sm:$0xf]
  %v1134 = vld [vmem:[%s1 + $0xfe4] sm:$0xf]
  %v1135 = vld [vmem:[%s1 + $0xfe8] sm:$0xf]
  %v1136 = vld [vmem:[%s1 + $0xfec] sm:$0xf]
  %v1137 = vld [vmem:[%s1 + $0xff0] sm:$0xf]
  %v1138 = vld [vmem:[%s1 + $0xff4] sm:$0xf]
  %v1139 = vld [vmem:[%s1 + $0xff8] sm:$0xf]
  %v1140 = vld [vmem:[%s1 + $0xffc] sm:$0xf]
  %v1141 = vld [vmem:[%s1 + $0x1000] sm:$0xf]
  %v1142 = vld [vmem:[%s1 + $0x1004] sm:$0xf]
  %v1143 = vld [vmem:[%s1 + $0x1008] sm:$0xf]
  %v1144 = vld [vmem:[%s1 + $0x100c] sm:$0xf]
  %v1145 = vld [vmem:[%s1 + $0x1010] sm:$0xf]
  %v1146 = vld [vmem:[%s1 + $0x1014] sm:$0xf]
  %v1147 = vld [vmem:[%s1 + $0x1018] sm:$0xf]
  %v1148 = vld [vmem:[%s1 + $0x101c] sm:$0xf]
  %v1149 = vld [vmem:[%s1 + $0x1020] sm:$0xf]
  %v1150 = vld [vmem:[%s1 + $0x1024] sm:$0xf]
  %v1151 = vld [vmem:[%s1 + $0x1028] sm:$0xf]
  %v1152 = vld [vmem:[%s1 + $0x102c] sm:$0xf]
  %v1153 = vld [vmem:[%s1 + $0x1030] sm:$0xf]
  %v1154 = vld [vmem:[%s1 + $0x1034] sm:$0xf]
  %v1155 = vld [vmem:[%s1 + $0x1038] sm:$0xf]
  %v1156 = vld [vmem:[%s1 + $0x103c] sm:$0xf]
  %v1157 = vld [vmem:[%s1 + $0x1040] sm:$0xf]
  %v1158 = vld [vmem:[%s1 + $0x1044] sm:$0xf]
  %v1159 = vld [vmem:[%s1 + $0x1048] sm:$0xf]
  %v1160 = vld [vmem:[%s1 + $0x104c] sm:$0xf]
  %v1161 = vld [vmem:[%s1 + $0x1050] sm:$0xf]
  %v1162 = vld [vmem:[%s1 + $0x1054] sm:$0xf]
  %v1163 = vld [vmem:[%s1 + $0x1058] sm:$0xf]
  %v1164 = vld [vmem:[%s1 + $0x105c] sm:$0xf]
  %v1165 = vld [vmem:[%s1 + $0x1060] sm:$0xf]
  %v1166 = vld [vmem:[%s1 + $0x1064] sm:$0xf]
  %v1167 = vld [vmem:[%s1 + $0x1068] sm:$0xf]
  %v1168 = vld [vmem:[%s1 + $0x106c] sm:$0xf]
  %v1169 = vld [vmem:[%s1 + $0x1070] sm:$0xf]
  %v1170 = vld [vmem:[%s1 + $0x1074] sm:$0xf]
  %v1171 = vld [vmem:[%s1 + $0x1078] sm:$0xf]
  %v1172 = vld [vmem:[%s1 + $0x107c] sm:$0xf]
  %v1173 = vld [vmem:[%s1 + $0x1080] sm:$0xf]
  %v1174 = vld [vmem:[%s1 + $0x1084] sm:$0xf]
  %v1175 = vld [vmem:[%s1 + $0x1088] sm:$0xf]
  %v1176 = vld [vmem:[%s1 + $0x108c] sm:$0xf]
  %v1177 = vld [vmem:[%s1 + $0x1090] sm:$0xf]
  %v1178 = vld [vmem:[%s1 + $0x1094] sm:$0xf]
  %v1179 = vld [vmem:[%s1 + $0x1098] sm:$0xf]
  %v1180 = vld [vmem:[%s1 + $0x109c] sm:$0xf]
  %v1181 = vld [vmem:[%s1 + $0x10a0] sm:$0xf]
  %v1182 = vld [vmem:[%s1 + $0x10a4] sm:$0xf]
  %v1183 = vld [vmem:[%s1 + $0x10a8] sm:$0xf]
  %v1184 = vld [vmem:[%s1 + $0x10ac] sm:$0xf]
  %v1185 = vld [vmem:[%s1 + $0x10b0] sm:$0xf]
  %v1186 = vld [vmem:[%s1 + $0x10b4] sm:$0xf]
  %v1187 = vld [vmem:[%s1 + $0x10b8] sm:$0xf]
  %v1188 = vld [vmem:[%s1 + $0x10bc] sm:$0xf]
  %v1189 = vld [vmem:[%s1 + $0x10c0] sm:$0xf]
  %v1190 = vld [vmem:[%s1 + $0x10c4] sm:$0xf]
  %v1191 = vld [vmem:[%s1 + $0x10c8] sm:$0xf]
  %v1192 = vld [vmem:[%s1 + $0x10cc] sm:$0xf]
  %v1193 = vld [vmem:[%s1 + $0x10d0] sm:$0xf]
  %v1194 = vld [vmem:[%s1 + $0x10d4] sm:$0xf]
  %v1195 = vld [vmem:[%s1 + $0x10d8] sm:$0xf]
  %v1196 = vld [vmem:[%s1 + $0x10dc] sm:$0xf]
  %v1197 = vld [vmem:[%s1 + $0x10e0] sm:$0xf]
  %v1198 = vld [vmem:[%s1 + $0x10e4] sm:$0xf]
  %v1199 = vld [vmem:[%s1 + $0x10e8] sm:$0xf]
  %v1200 = vld [vmem:[%s1 + $0x10ec] sm:$0xf]
  %v1201 = vld [vmem:[%s1 + $0x10f0] sm:$0xf]
  %v1202 = vld [vmem:[%s1 + $0x10f4] sm:$0xf]
  %v1203 = vld [vmem:[%s1 + $0x10f8] sm:$0xf]
  %v1204 = vld [vmem:[%s1 + $0x10fc] sm:$0xf]
  %v1205 = vld [vmem:[%s1 + $0x1100] sm:$0xf]
  %v1206 = vld [vmem:[%s1 + $0x1104] sm:$0xf]
  %v1207 = vld [vmem:[%s1 + $0x1108] sm:$0xf]
  %v1208 = vld [vmem:[%s1 + $0x110c] sm:$0xf]
  %v1209 = vld [vmem:[%s1 + $0x1110] sm:$0xf]
  %v1210 = vld [vmem:[%s1 + $0x1114] sm:$0xf]
  %v1211 = vld [vmem:[%s1 + $0x1118] sm:$0xf]
  %v1212 = vld [vmem:[%s1 + $0x111c] sm:$0xf]
  %v1213 = vld [vmem:[%s1 + $0x1120] sm:$0xf]
  %v1214 = vld [vmem:[%s1 + $0x1124] sm:$0xf]
  %v1215 = vld [vmem:[%s1 + $0x1128] sm:$0xf]
  %v1216 = vld [vmem:[%s1 + $0x112c] sm:$0xf]
  %v1217 = vld [vmem:[%s1 + $0x1130] sm:$0xf]
  %v1218 = vld [vmem:[%s1 + $0x1134] sm:$0xf]
  %v1219 = vld [vmem:[%s1 + $0x1138] sm:$0xf]
  %v1220 = vld [vmem:[%s1 + $0x113c] sm:$0xf]
  %v1221 = vld [vmem:[%s1 + $0x1140] sm:$0xf]
  %v1222 = vld [vmem:[%s1 + $0x1144] sm:$0xf]
  %v1223 = vld [vmem:[%s1 + $0x1148] sm:$0xf]
  %v1224 = vld [vmem:[%s1 + $0x114c] sm:$0xf]
  %v1225 = vld [vmem:[%s1 + $0x1150] sm:$0xf]
  %v1226 = vld [vmem:[%s1 + $0x1154] sm:$0xf]
  %v1227 = vld [vmem:[%s1 + $0x1158] sm:$0xf]
  %v1228 = vld [vmem:[%s1 + $0x115c] sm:$0xf]
  %v1229 = vld [vmem:[%s1 + $0x1160] sm:$0xf]
  %v1230 = vld [vmem:[%s1 + $0x1164] sm:$0xf]
  %v1231 = vld [vmem:[%s1 + $0x1168] sm:$0xf]
  %v1232 = vld [vmem:[%s1 + $0x116c] sm:$0xf]
  %v1233 = vld [vmem:[%s1 + $0x1170] sm:$0xf]
  %v1234 = vld [vmem:[%s1 + $0x1174] sm:$0xf]
  %v1235 = vld [vmem:[%s1 + $0x1178] sm:$0xf]
  %v1236 = vld [vmem:[%s1 + $0x117c] sm:$0xf]
  %v1237 = vld [vmem:[%s1 + $0x1180] sm:$0xf]
  %v1238 = vld [vmem:[%s1 + $0x1184] sm:$0xf]
  %v1239 = vld [vmem:[%s1 + $0x1188] sm:$0xf]
  %v1240 = vld [vmem:[%s1 + $0x118c] sm:$0xf]
  %v1241 = vld [vmem:[%s1 + $0x1190] sm:$0xf]
  %v1242 = vld [vmem:[%s1 + $0x1194] sm:$0xf]
  %v1243 = vld [vmem:[%s1 + $0x1198] sm:$0xf]
  %v1244 = vld [vmem:[%s1 + $0x119c] sm:$0xf]
  %v1245 = vld [vmem:[%s1 + $0x11a0] sm:$0xf]
  %v1246 = vld [vmem:[%s1 + $0x11a4] sm:$0xf]
  %v1247 = vld [vmem:[%s1 + $0x11a8] sm:$0xf]
  %v1248 = vld [vmem:[%s1 + $0x11ac] sm:$0xf]
  %v1249 = vld [vmem:[%s1 + $0x11b0] sm:$0xf]
  %v1250 = vld [vmem:[%s1 + $0x11b4] sm:$0xf]
  %v1251 = vld [vmem:[%s1 + $0x11b8] sm:$0xf]
  %v1252 = vld [vmem:[%s1 + $0x11bc] sm:$0xf]
  %v1253 = vld [vmem:[%s1 + $0x11c0] sm:$0xf]
  %v1254 = vld [vmem:[%s1 + $0x11c4] sm:$0xf]
  %v1255 = vld [vmem:[%s1 + $0x11c8] sm:$0xf]
  %v1256 = vld [vmem:[%s1 + $0x11cc] sm:$0xf]
  %v1257 = vld [vmem:[%s1 + $0x11d0] sm:$0xf]
  %v1258 = vld [vmem:[%s1 + $0x11d4] sm:$0xf]
  %v1259 = vld [vmem:[%s1 + $0x11d8] sm:$0xf]
  %v1260 = vld [vmem:[%s1 + $0x11dc] sm:$0xf]
  %v1261 = vld [vmem:[%s1 + $0x11e0] sm:$0xf]
  %v1262 = vld [vmem:[%s1 + $0x11e4] sm:$0xf]
  %v1263 = vld [vmem:[%s1 + $0x11e8] sm:$0xf]
  %v1264 = vld [vmem:[%s1 + $0x11ec] sm:$0xf]
  %v1265 = vld [vmem:[%s1 + $0x11f0] sm:$0xf]
  %v1266 = vld [vmem:[%s1 + $0x11f4] sm:$0xf]
  %v1267 = vld [vmem:[%s1 + $0x11f8] sm:$0xf]
  %v1268 = vld [vmem:[%s1 + $0x11fc] sm:$0xf]
  %v1269 = vld [vmem:[%s1 + $0x1200] sm:$0xf]
  %v1270 = vld [vmem:[%s1 + $0x1204] sm:$0xf]
  %v1271 = vld [vmem:[%s1 + $0x1208] sm:$0xf]
  %v1272 = vld [vmem:[%s1 + $0x120c] sm:$0xf]
  %v1273 = vld [vmem:[%s1 + $0x1210] sm:$0xf]
  %v1274 = vld [vmem:[%s1 + $0x1214] sm:$0xf]
  %v1275 = vld [vmem:[%s1 + $0x1218] sm:$0xf]
  %v1276 = vld [vmem:[%s1 + $0x121c] sm:$0xf]
  %v1277 = vld [vmem:[%s1 + $0x1220] sm:$0xf]
  %v1278 = vld [vmem:[%s1 + $0x1224] sm:$0xf]
  %v1279 = vld [vmem:[%s1 + $0x1228] sm:$0xf]
  %v1280 = vld [vmem:[%s1 + $0x122c] sm:$0xf]
  %v1281 = vld [vmem:[%s1 + $0x1230] sm:$0xf]
  %v1282 = vld [vmem:[%s1 + $0x1234] sm:$0xf]
  %v1283 = vld [vmem:[%s1 + $0x1238] sm:$0xf]
  %v1284 = vld [vmem:[%s1 + $0x123c] sm:$0xf]
  %v1285 = vld [vmem:[%s1 + $0x1240] sm:$0xf]
  %v1286 = vld [vmem:[%s1 + $0x1244] sm:$0xf]
  %v1287 = vld [vmem:[%s1 + $0x1248] sm:$0xf]
  %v1288 = vld [vmem:[%s1 + $0x124c] sm:$0xf]
  %v1289 = vld [vmem:[%s1 + $0x1250] sm:$0xf]
  %v1290 = vld [vmem:[%s1 + $0x1254] sm:$0xf]
  %v1291 = vld [vmem:[%s1 + $0x1258] sm:$0xf]
  %v1292 = vld [vmem:[%s1 + $0x125c] sm:$0xf]
  %v1293 = vld [vmem:[%s1 + $0x1260] sm:$0xf]
  %v1294 = vld [vmem:[%s1 + $0x1264] sm:$0xf]
  %v1295 = vld [vmem:[%s1 + $0x1268] sm:$0xf]
  %v1296 = vld [vmem:[%s1 + $0x126c] sm:$0xf]
  %v1297 = vld [vmem:[%s1 + $0x1270] sm:$0xf]
  %v1298 = vld [vmem:[%s1 + $0x1274] sm:$0xf]
  %v1299 = vld [vmem:[%s1 + $0x1278] sm:$0xf]
  %v1300 = vld [vmem:[%s1 + $0x127c] sm:$0xf]
  %v1301 = vld [vmem:[%s1 + $0x1280] sm:$0xf]
  %v1302 = vld [vmem:[%s1 + $0x1284] sm:$0xf]
  %v1303 = vld [vmem:[%s1 + $0x1288] sm:$0xf]
  %v1304 = vld [vmem:[%s1 + $0x128c] sm:$0xf]
  %v1305 = vld [vmem:[%s1 + $0x1290] sm:$0xf]
  %v1306 = vld [vmem:[%s1 + $0x1294] sm:$0xf]
  %v1307 = vld [vmem:[%s1 + $0x1298] sm:$0xf]
  %v1308 = vld [vmem:[%s1 + $0x129c] sm:$0xf]
  %v1309 = vld [vmem:[%s1 + $0x12a0] sm:$0xf]
  %v1310 = vld [vmem:[%s1 + $0x12a4] sm:$0xf]
  %v1311 = vld [vmem:[%s1 + $0x12a8] sm:$0xf]
  %v1312 = vld [vmem:[%s1 + $0x12ac] sm:$0xf]
  %v1313 = vld [vmem:[%s1 + $0x12b0] sm:$0xf]
  %v1314 = vld [vmem:[%s1 + $0x12b4] sm:$0xf]
  %v1315 = vld [vmem:[%s1 + $0x12b8] sm:$0xf]
  %v1316 = vld [vmem:[%s1 + $0x12bc] sm:$0xf]
  %v1317 = vld [vmem:[%s1 + $0x12c0] sm:$0xf]
  %v1318 = vld [vmem:[%s1 + $0x12c4] sm:$0xf]
  %v1319 = vld [vmem:[%s1 + $0x12c8] sm:$0xf]
  %v1320 = vld [vmem:[%s1 + $0x12cc] sm:$0xf]
  %v1321 = vld [vmem:[%s1 + $0x12d0] sm:$0xf]
  %v1322 = vld [vmem:[%s1 + $0x12d4] sm:$0xf]
  %v1323 = vld [vmem:[%s1 + $0x12d8] sm:$0xf]
  %v1324 = vld [vmem:[%s1 + $0x12dc] sm:$0xf]
  %v1325 = vld [vmem:[%s1 + $0x12e0] sm:$0xf]
  %v1326 = vld [vmem:[%s1 + $0x12e4] sm:$0xf]
  %v1327 = vld [vmem:[%s1 + $0x12e8] sm:$0xf]
  %v1328 = vld [vmem:[%s1 + $0x12ec] sm:$0xf]
  %v1329 = vld [vmem:[%s1 + $0x12f0] sm:$0xf]
  %v1330 = vld [vmem:[%s1 + $0x12f4] sm:$0xf]
  %v1331 = vld [vmem:[%s1 + $0x12f8] sm:$0xf]
  %v1332 = vld [vmem:[%s1 + $0x12fc] sm:$0xf]
  %v1333 = vld [vmem:[%s1 + $0x1300] sm:$0xf]
  %v1334 = vld [vmem:[%s1 + $0x1304] sm:$0xf]
  %v1335 = vld [vmem:[%s1 + $0x1308] sm:$0xf]
  %v1336 = vld [vmem:[%s1 + $0x130c] sm:$0xf]
  %v1337 = vld [vmem:[%s1 + $0x1310] sm:$0xf]
  %v1338 = vld [vmem:[%s1 + $0x1314] sm:$0xf]
  %v1339 = vld [vmem:[%s1 + $0x1318] sm:$0xf]
  %v1340 = vld [vmem:[%s1 + $0x131c] sm:$0xf]
  %v1341 = vld [vmem:[%s1 + $0x1320] sm:$0xf]
  %v1342 = vld [vmem:[%s1 + $0x1324] sm:$0xf]
  %v1343 = vld [vmem:[%s1 + $0x1328] sm:$0xf]
  %v1344 = vld [vmem:[%s1 + $0x132c] sm:$0xf]
  %v1345 = vld [vmem:[%s1 + $0x1330] sm:$0xf]
  %v1346 = vld [vmem:[%s1 + $0x1334] sm:$0xf]
  %v1347 = vld [vmem:[%s1 + $0x1338] sm:$0xf]
  %v1348 = vld [vmem:[%s1 + $0x133c] sm:$0xf]
  %v1349 = vld [vmem:[%s1 + $0x1340] sm:$0xf]
  %v1350 = vld [vmem:[%s1 + $0x1344] sm:$0xf]
  %v1351 = vld [vmem:[%s1 + $0x1348] sm:$0xf]
  %v1352 = vld [vmem:[%s1 + $0x134c] sm:$0xf]
  %v1353 = vld [vmem:[%s1 + $0x1350] sm:$0xf]
  %v1354 = vld [vmem:[%s1 + $0x1354] sm:$0xf]
  %v1355 = vld [vmem:[%s1 + $0x1358] sm:$0xf]
  %v1356 = vld [vmem:[%s1 + $0x135c] sm:$0xf]
  %v1357 = vld [vmem:[%s1 + $0x1360] sm:$0xf]
  %v1358 = vld [vmem:[%s1 + $0x1364] sm:$0xf]
  %v1359 = vld [vmem:[%s1 + $0x1368] sm:$0xf]
  %v1360 = vld [vmem:[%s1 + $0x136c] sm:$0xf]
  %v1361 = vld [vmem:[%s1 + $0x1370] sm:$0xf]
  %v1362 = vld [vmem:[%s1 + $0x1374] sm:$0xf]
  %v1363 = vld [vmem:[%s1 + $0x1378] sm:$0xf]
  %v1364 = vld [vmem:[%s1 + $0x137c] sm:$0xf]
  %v1365 = vld [vmem:[%s1 + $0x1380] sm:$0xf]
  %v1366 = vld [vmem:[%s1 + $0x1384] sm:$0xf]
  %v1367 = vld [vmem:[%s1 + $0x1388] sm:$0xf]
  %v1368 = vld [vmem:[%s1 + $0x138c] sm:$0xf]
  %v1369 = vld [vmem:[%s1 + $0x1390] sm:$0xf]
  %v1370 = vld [vmem:[%s1 + $0x1394] sm:$0xf]
  %v1371 = vld [vmem:[%s1 + $0x1398] sm:$0xf]
  %v1372 = vld [vmem:[%s1 + $0x139c] sm:$0xf]
  %v1373 = vld [vmem:[%s1 + $0x13a0] sm:$0xf]
  %v1374 = vld [vmem:[%s1 + $0x13a4] sm:$0xf]
  %v1375 = vld [vmem:[%s1 + $0x13a8] sm:$0xf]
  %v1376 = vld [vmem:[%s1 + $0x13ac] sm:$0xf]
  %v1377 = vld [vmem:[%s1 + $0x13b0] sm:$0xf]
  %v1378 = vld [vmem:[%s1 + $0x13b4] sm:$0xf]
  %v1379 = vld [vmem:[%s1 + $0x13b8] sm:$0xf]
  %v1380 = vld [vmem:[%s1 + $0x13bc] sm:$0xf]
  %v1381 = vld [vmem:[%s1 + $0x13c0] sm:$0xf]
  %v1382 = vld [vmem:[%s1 + $0x13c4] sm:$0xf]
  %v1383 = vld [vmem:[%s1 + $0x13c8] sm:$0xf]
  %v1384 = vld [vmem:[%s1 + $0x13cc] sm:$0xf]
  %v1385 = vld [vmem:[%s1 + $0x13d0] sm:$0xf]
  %v1386 = vld [vmem:[%s1 + $0x13d4] sm:$0xf]
  %v1387 = vld [vmem:[%s1 + $0x13d8] sm:$0xf]
  %v1388 = vld [vmem:[%s1 + $0x13dc] sm:$0xf]
  %v1389 = vld [vmem:[%s1 + $0x13e0] sm:$0xf]
  %v1390 = vld [vmem:[%s1 + $0x13e4] sm:$0xf]
  %v1391 = vld [vmem:[%s1 + $0x13e8] sm:$0xf]
  %v1392 = vld [vmem:[%s1 + $0x13ec] sm:$0xf]
  %v1393 = vld [vmem:[%s1 + $0x13f0] sm:$0xf]
  %v1394 = vld [vmem:[%s1 + $0x13f4] sm:$0xf]
  %v1395 = vld [vmem:[%s1 + $0x13f8] sm:$0xf]
  %v1396 = vld [vmem:[%s1 + $0x13fc] sm:$0xf]
  %v1397 = vld [vmem:[%s1 + $0x1400] sm:$0xf]
  %v1398 = vld [vmem:[%s1 + $0x1404] sm:$0xf]
  %v1399 = vld [vmem:[%s1 + $0x1408] sm:$0xf]
  %v1400 = vld [vmem:[%s1 + $0x140c] sm:$0xf]
  %v1401 = vld [vmem:[%s1 + $0x1410] sm:$0xf]
  %v1402 = vld [vmem:[%s1 + $0x1414] sm:$0xf]
  %v1403 = vld [vmem:[%s1 + $0x1418] sm:$0xf]
  %v1404 = vld [vmem:[%s1 + $0x141c] sm:$0xf]
  %v1405 = vld [vmem:[%s1 + $0x1420] sm:$0xf]
  %v1406 = vld [vmem:[%s1 + $0x1424] sm:$0xf]
  %v1407 = vld [vmem:[%s1 + $0x1428] sm:$0xf]
  %v1408 = vld [vmem:[%s1 + $0x142c] sm:$0xf]
  %v1409 = vld [vmem:[%s1 + $0x1430] sm:$0xf]
  %v1410 = vld [vmem:[%s1 + $0x1434] sm:$0xf]
  %v1411 = vld [vmem:[%s1 + $0x1438] sm:$0xf]
  %v1412 = vld [vmem:[%s1 + $0x143c] sm:$0xf]
  %v1413 = vld [vmem:[%s1 + $0x1440] sm:$0xf]
  %v1414 = vld [vmem:[%s1 + $0x1444] sm:$0xf]
  %v1415 = vld [vmem:[%s1 + $0x1448] sm:$0xf]
  %v1416 = vld [vmem:[%s1 + $0x144c] sm:$0xf]
  %v1417 = vld [vmem:[%s1 + $0x1450] sm:$0xf]
  %v1418 = vld [vmem:[%s1 + $0x1454] sm:$0xf]
  %v1419 = vld [vmem:[%s1 + $0x1458] sm:$0xf]
  %v1420 = vld [vmem:[%s1 + $0x145c] sm:$0xf]
  %v1421 = vld [vmem:[%s1 + $0x1460] sm:$0xf]
  %v1422 = vld [vmem:[%s1 + $0x1464] sm:$0xf]
  %v1423 = vld [vmem:[%s1 + $0x1468] sm:$0xf]
  %v1424 = vld [vmem:[%s1 + $0x146c] sm:$0xf]
  %v1425 = vld [vmem:[%s1 + $0x1470] sm:$0xf]
  %v1426 = vld [vmem:[%s1 + $0x1474] sm:$0xf]
  %v1427 = vld [vmem:[%s1 + $0x1478] sm:$0xf]
  %v1428 = vld [vmem:[%s1 + $0x147c] sm:$0xf]
  %v1429 = vld [vmem:[%s1 + $0x1480] sm:$0xf]
  %v1430 = vld [vmem:[%s1 + $0x1484] sm:$0xf]
  %v1431 = vld [vmem:[%s1 + $0x1488] sm:$0xf]
  %v1432 = vld [vmem:[%s1 + $0x148c] sm:$0xf]
  %v1433 = vld [vmem:[%s1 + $0x1490] sm:$0xf]
  %v1434 = vld [vmem:[%s1 + $0x1494] sm:$0xf]
  %v1435 = vld [vmem:[%s1 + $0x1498] sm:$0xf]
  %v1436 = vld [vmem:[%s1 + $0x149c] sm:$0xf]
  %v1437 = vld [vmem:[%s1 + $0x14a0] sm:$0xf]
  %v1438 = vld [vmem:[%s1 + $0x14a4] sm:$0xf]
  %v1439 = vld [vmem:[%s1 + $0x14a8] sm:$0xf]
  %v1440 = vld [vmem:[%s1 + $0x14ac] sm:$0xf]
  %v1441 = vld [vmem:[%s1 + $0x14b0] sm:$0xf]
  %v1442 = vld [vmem:[%s1 + $0x14b4] sm:$0xf]
  %v1443 = vld [vmem:[%s1 + $0x14b8] sm:$0xf]
  %v1444 = vld [vmem:[%s1 + $0x14bc] sm:$0xf]
  %v1445 = vld [vmem:[%s1 + $0x14c0] sm:$0xf]
  %v1446 = vld [vmem:[%s1 + $0x14c4] sm:$0xf]
  %v1447 = vld [vmem:[%s1 + $0x14c8] sm:$0xf]
  %v1448 = vld [vmem:[%s1 + $0x14cc] sm:$0xf]
  %v1449 = vld [vmem:[%s1 + $0x14d0] sm:$0xf]
  %v1450 = vld [vmem:[%s1 + $0x14d4] sm:$0xf]
  %v1451 = vld [vmem:[%s1 + $0x14d8] sm:$0xf]
  %v1452 = vld [vmem:[%s1 + $0x14dc] sm:$0xf]
  %v1453 = vld [vmem:[%s1 + $0x14e0] sm:$0xf]
  %v1454 = vld [vmem:[%s1 + $0x14e4] sm:$0xf]
  %v1455 = vld [vmem:[%s1 + $0x14e8] sm:$0xf]
  %v1456 = vld [vmem:[%s1 + $0x14ec] sm:$0xf]
  %v1457 = vld [vmem:[%s1 + $0x14f0] sm:$0xf]
  %v1458 = vld [vmem:[%s1 + $0x14f4] sm:$0xf]
  %v1459 = vld [vmem:[%s1 + $0x14f8] sm:$0xf]
  %v1460 = vld [vmem:[%s1 + $0x14fc] sm:$0xf]
  %v1461 = vld [vmem:[%s1 + $0x1500] sm:$0xf]
  %v1462 = vld [vmem:[%s1 + $0x1504] sm:$0xf]
  %v1463 = vld [vmem:[%s1 + $0x1508] sm:$0xf]
  %v1464 = vld [vmem:[%s1 + $0x150c] sm:$0xf]
  %v1465 = vld [vmem:[%s1 + $0x1510] sm:$0xf]
  %v1466 = vld [vmem:[%s1 + $0x1514] sm:$0xf]
  %v1467 = vld [vmem:[%s1 + $0x1518] sm:$0xf]
  %v1468 = vld [vmem:[%s1 + $0x151c] sm:$0xf]
  %v1469 = vld [vmem:[%s1 + $0x1520] sm:$0xf]
  %v1470 = vld [vmem:[%s1 + $0x1524] sm:$0xf]
  %v1471 = vld [vmem:[%s1 + $0x1528] sm:$0xf]
  %v1472 = vld [vmem:[%s1 + $0x152c] sm:$0xf]
  %v1473 = vld [vmem:[%s1 + $0x1530] sm:$0xf]
  %v1474 = vld [vmem:[%s1 + $0x1534] sm:$0xf]
  %v1475 = vld [vmem:[%s1 + $0x1538] sm:$0xf]
  %v1476 = vld [vmem:[%s1 + $0x153c] sm:$0xf]
  %v1477 = vld [vmem:[%s1 + $0x1540] sm:$0xf]
  %v1478 = vld [vmem:[%s1 + $0x1544] sm:$0xf]
  %v1479 = vld [vmem:[%s1 + $0x1548] sm:$0xf]
  %v1480 = vld [vmem:[%s1 + $0x154c] sm:$0xf]
  %v1481 = vld [vmem:[%s1 + $0x1550] sm:$0xf]
  %v1482 = vld [vmem:[%s1 + $0x1554] sm:$0xf]
  %v1483 = vld [vmem:[%s1 + $0x1558] sm:$0xf]
  %v1484 = vld [vmem:[%s1 + $0x155c] sm:$0xf]
  %v1485 = vld [vmem:[%s1 + $0x1560] sm:$0xf]
  %v1486 = vld [vmem:[%s1 + $0x1564] sm:$0xf]
  %v1487 = vld [vmem:[%s1 + $0x1568] sm:$0xf]
  %v1488 = vld [vmem:[%s1 + $0x156c] sm:$0xf]
  %v1489 = vld [vmem:[%s1 + $0x1570] sm:$0xf]
  %v1490 = vld [vmem:[%s1 + $0x1574] sm:$0xf]
  %v1491 = vld [vmem:[%s1 + $0x1578] sm:$0xf]
  %v1492 = vld [vmem:[%s1 + $0x157c] sm:$0xf]
  %v1493 = vld [vmem:[%s1 + $0x1580] sm:$0xf]
  %v1494 = vld [vmem:[%s1 + $0x1584] sm:$0xf]
  %v1495 = vld [vmem:[%s1 + $0x1588] sm:$0xf]
  %v1496 = vld [vmem:[%s1 + $0x158c] sm:$0xf]
  %v1497 = vld [vmem:[%s1 + $0x1590] sm:$0xf]
  %v1498 = vld [vmem:[%s1 + $0x1594] sm:$0xf]
  %v1499 = vld [vmem:[%s1 + $0x1598] sm:$0xf]
  %v1500 = vld [vmem:[%s1 + $0x159c] sm:$0xf]
  %v1501 = vld [vmem:[%s1 + $0x15a0] sm:$0xf]
  %v1502 = vld [vmem:[%s1 + $0x15a4] sm:$0xf]
  %v1503 = vld [vmem:[%s1 + $0x15a8] sm:$0xf]
  %v1504 = vld [vmem:[%s1 + $0x15ac] sm:$0xf]
  %v1505 = vld [vmem:[%s1 + $0x15b0] sm:$0xf]
  %v1506 = vld [vmem:[%s1 + $0x15b4] sm:$0xf]
  %v1507 = vld [vmem:[%s1 + $0x15b8] sm:$0xf]
  %v1508 = vld [vmem:[%s1 + $0x15bc] sm:$0xf]
  %v1509 = vld [vmem:[%s1 + $0x15c0] sm:$0xf]
  %v1510 = vld [vmem:[%s1 + $0x15c4] sm:$0xf]
  %v1511 = vld [vmem:[%s1 + $0x15c8] sm:$0xf]
  %v1512 = vld [vmem:[%s1 + $0x15cc] sm:$0xf]
  %v1513 = vld [vmem:[%s1 + $0x15d0] sm:$0xf]
  %v1514 = vld [vmem:[%s1 + $0x15d4] sm:$0xf]
  %v1515 = vld [vmem:[%s1 + $0x15d8] sm:$0xf]
  %v1516 = vld [vmem:[%s1 + $0x15dc] sm:$0xf]
  %v1517 = vld [vmem:[%s1 + $0x15e0] sm:$0xf]
  %v1518 = vld [vmem:[%s1 + $0x15e4] sm:$0xf]
  %v1519 = vld [vmem:[%s1 + $0x15e8] sm:$0xf]
  %v1520 = vld [vmem:[%s1 + $0x15ec] sm:$0xf]
  %v1521 = vld [vmem:[%s1 + $0x15f0] sm:$0xf]
  %v1522 = vld [vmem:[%s1 + $0x15f4] sm:$0xf]
  %v1523 = vld [vmem:[%s1 + $0x15f8] sm:$0xf]
  %v1524 = vld [vmem:[%s1 + $0x15fc] sm:$0xf]
  %v1525 = vld [vmem:[%s1 + $0x1600] sm:$0xf]
  %v1526 = vld [vmem:[%s1 + $0x1604] sm:$0xf]
  %v1527 = vld [vmem:[%s1 + $0x1608] sm:$0xf]
  %v1528 = vld [vmem:[%s1 + $0x160c] sm:$0xf]
  %v1529 = vld [vmem:[%s1 + $0x1610] sm:$0xf]
  %v1530 = vld [vmem:[%s1 + $0x1614] sm:$0xf]
  %v1531 = vld [vmem:[%s1 + $0x1618] sm:$0xf]
  %v1532 = vld [vmem:[%s1 + $0x161c] sm:$0xf]
  %v1533 = vld [vmem:[%s1 + $0x1620] sm:$0xf]
  %v1534 = vld [vmem:[%s1 + $0x1624] sm:$0xf]
  %v1535 = vld [vmem:[%s1 + $0x1628] sm:$0xf]
  %v1536 = vld [vmem:[%s1 + $0x162c] sm:$0xf]
  %v1537 = vld [vmem:[%s1 + $0x1630] sm:$0xf]
  %v1538 = vld [vmem:[%s1 + $0x1634] sm:$0xf]
  %v1539 = vld [vmem:[%s1 + $0x1638] sm:$0xf]
  %v1540 = vld [vmem:[%s1 + $0x163c] sm:$0xf]
  %v1541 = vld [vmem:[%s1 + $0x1640] sm:$0xf]
  %v1542 = vld [vmem:[%s1 + $0x1644] sm:$0xf]
  %v1543 = vld [vmem:[%s1 + $0x1648] sm:$0xf]
  %v1544 = vld [vmem:[%s1 + $0x164c] sm:$0xf]
  %v1545 = vld [vmem:[%s1 + $0x1650] sm:$0xf]
  %v1546 = vld [vmem:[%s1 + $0x1654] sm:$0xf]
  %v1547 = vld [vmem:[%s1 + $0x1658] sm:$0xf]
  %v1548 = vld [vmem:[%s1 + $0x165c] sm:$0xf]
  %v1549 = vld [vmem:[%s1 + $0x1660] sm:$0xf]
  %v1550 = vld [vmem:[%s1 + $0x1664] sm:$0xf]
  %v1551 = vld [vmem:[%s1 + $0x1668] sm:$0xf]
  %v1552 = vld [vmem:[%s1 + $0x166c] sm:$0xf]
  %v1553 = vld [vmem:[%s1 + $0x1670] sm:$0xf]
  %v1554 = vld [vmem:[%s1 + $0x1674] sm:$0xf]
  %v1555 = vld [vmem:[%s1 + $0x1678] sm:$0xf]
  %v1556 = vld [vmem:[%s1 + $0x167c] sm:$0xf]
  %v1557 = vld [vmem:[%s1 + $0x1680] sm:$0xf]
  %v1558 = vld [vmem:[%s1 + $0x1684] sm:$0xf]
  %v1559 = vld [vmem:[%s1 + $0x1688] sm:$0xf]
  %v1560 = vld [vmem:[%s1 + $0x168c] sm:$0xf]
  %v1561 = vld [vmem:[%s1 + $0x1690] sm:$0xf]
  %v1562 = vld [vmem:[%s1 + $0x1694] sm:$0xf]
  %v1563 = vld [vmem:[%s1 + $0x1698] sm:$0xf]
  %v1564 = vld [vmem:[%s1 + $0x169c] sm:$0xf]
  %v1565 = vld [vmem:[%s1 + $0x16a0] sm:$0xf]
  %v1566 = vld [vmem:[%s1 + $0x16a4] sm:$0xf]
  %v1567 = vld [vmem:[%s1 + $0x16a8] sm:$0xf]
  %v1568 = vld [vmem:[%s1 + $0x16ac] sm:$0xf]
  %v1569 = vld [vmem:[%s1 + $0x16b0] sm:$0xf]
  %v1570 = vld [vmem:[%s1 + $0x16b4] sm:$0xf]
  %v1571 = vld [vmem:[%s1 + $0x16b8] sm:$0xf]
  %v1572 = vld [vmem:[%s1 + $0x16bc] sm:$0xf]
  %v1573 = vld [vmem:[%s1 + $0x16c0] sm:$0xf]
  %v1574 = vld [vmem:[%s1 + $0x16c4] sm:$0xf]
  %v1575 = vld [vmem:[%s1 + $0x16c8] sm:$0xf]
  %v1576 = vld [vmem:[%s1 + $0x16cc] sm:$0xf]
  %v1577 = vld [vmem:[%s1 + $0x16d0] sm:$0xf]
  %v1578 = vld [vmem:[%s1 + $0x16d4] sm:$0xf]
  %v1579 = vld [vmem:[%s1 + $0x16d8] sm:$0xf]
  %v1580 = vld [vmem:[%s1 + $0x16dc] sm:$0xf]
  %v1581 = vld [vmem:[%s1 + $0x16e0] sm:$0xf]
  %v1582 = vld [vmem:[%s1 + $0x16e4] sm:$0xf]
  %v1583 = vld [vmem:[%s1 + $0x16e8] sm:$0xf]
  %v1584 = vld [vmem:[%s1 + $0x16ec] sm:$0xf]
  %v1585 = vld [vmem:[%s1 + $0x16f0] sm:$0xf]
  %v1586 = vld [vmem:[%s1 + $0x16f4] sm:$0xf]
  %v1587 = vld [vmem:[%s1 + $0x16f8] sm:$0xf]
  %v1588 = vld [vmem:[%s1 + $0x16fc] sm:$0xf]
  %v1589 = vld [vmem:[%s1 + $0x1700] sm:$0xf]
  %v1590 = vld [vmem:[%s1 + $0x1704] sm:$0xf]
  %v1591 = vld [vmem:[%s1 + $0x1708] sm:$0xf]
  %v1592 = vld [vmem:[%s1 + $0x170c] sm:$0xf]
  %v1593 = vld [vmem:[%s1 + $0x1710] sm:$0xf]
  %v1594 = vld [vmem:[%s1 + $0x1714] sm:$0xf]
  %v1595 = vld [vmem:[%s1 + $0x1718] sm:$0xf]
  %v1596 = vld [vmem:[%s1 + $0x171c] sm:$0xf]
  %v1597 = vld [vmem:[%s1 + $0x1720] sm:$0xf]
  %v1598 = vld [vmem:[%s1 + $0x1724] sm:$0xf]
  %v1599 = vld [vmem:[%s1 + $0x1728] sm:$0xf]
  %v1600 = vld [vmem:[%s1 + $0x172c] sm:$0xf]
  %v1601 = vld [vmem:[%s1 + $0x1730] sm:$0xf]
  %v1602 = vld [vmem:[%s1 + $0x1734] sm:$0xf]
  %v1603 = vld [vmem:[%s1 + $0x1738] sm:$0xf]
  %v1604 = vld [vmem:[%s1 + $0x173c] sm:$0xf]
  %v1605 = vld [vmem:[%s1 + $0x1740] sm:$0xf]
  %v1606 = vld [vmem:[%s1 + $0x1744] sm:$0xf]
  %v1607 = vld [vmem:[%s1 + $0x1748] sm:$0xf]
  %v1608 = vld [vmem:[%s1 + $0x174c] sm:$0xf]
  %v1609 = vld [vmem:[%s1 + $0x1750] sm:$0xf]
  %v1610 = vld [vmem:[%s1 + $0x1754] sm:$0xf]
  %v1611 = vld [vmem:[%s1 + $0x1758] sm:$0xf]
  %v1612 = vld [vmem:[%s1 + $0x175c] sm:$0xf]
  %v1613 = vld [vmem:[%s1 + $0x1760] sm:$0xf]
  %v1614 = vld [vmem:[%s1 + $0x1764] sm:$0xf]
  %v1615 = vld [vmem:[%s1 + $0x1768] sm:$0xf]
  %v1616 = vld [vmem:[%s1 + $0x176c] sm:$0xf]
  %v1617 = vld [vmem:[%s1 + $0x1770] sm:$0xf]
  %v1618 = vld [vmem:[%s1 + $0x1774] sm:$0xf]
  %v1619 = vld [vmem:[%s1 + $0x1778] sm:$0xf]
  %v1620 = vld [vmem:[%s1 + $0x177c] sm:$0xf]
  %v1621 = vld [vmem:[%s1 + $0x1780] sm:$0xf]
  %v1622 = vld [vmem:[%s1 + $0x1784] sm:$0xf]
  %v1623 = vld [vmem:[%s1 + $0x1788] sm:$0xf]
  %v1624 = vld [vmem:[%s1 + $0x178c] sm:$0xf]
  %v1625 = vld [vmem:[%s1 + $0x1790] sm:$0xf]
  %v1626 = vld [vmem:[%s1 + $0x1794] sm:$0xf]
  %v1627 = vld [vmem:[%s1 + $0x1798] sm:$0xf]
  %v1628 = vld [vmem:[%s1 + $0x179c] sm:$0xf]
  %v1629 = vld [vmem:[%s1 + $0x17a0] sm:$0xf]
  %v1630 = vld [vmem:[%s1 + $0x17a4] sm:$0xf]
  %v1631 = vld [vmem:[%s1 + $0x17a8] sm:$0xf]
  %v1632 = vld [vmem:[%s1 + $0x17ac] sm:$0xf]
  %v1633 = vld [vmem:[%s1 + $0x17b0] sm:$0xf]
  %v1634 = vld [vmem:[%s1 + $0x17b4] sm:$0xf]
  %v1635 = vld [vmem:[%s1 + $0x17b8] sm:$0xf]
  %v1636 = vld [vmem:[%s1 + $0x17bc] sm:$0xf]
  %v1637 = vld [vmem:[%s1 + $0x17c0] sm:$0xf]
  %v1638 = vld [vmem:[%s1 + $0x17c4] sm:$0xf]
  %v1639 = vld [vmem:[%s1 + $0x17c8] sm:$0xf]
  %v1640 = vld [vmem:[%s1 + $0x17cc] sm:$0xf]
  %v1641 = vld [vmem:[%s1 + $0x17d0] sm:$0xf]
  %v1642 = vld [vmem:[%s1 + $0x17d4] sm:$0xf]
  %v1643 = vld [vmem:[%s1 + $0x17d8] sm:$0xf]
  %v1644 = vld [vmem:[%s1 + $0x17dc] sm:$0xf]
  %v1645 = vld [vmem:[%s1 + $0x17e0] sm:$0xf]
  %v1646 = vld [vmem:[%s1 + $0x17e4] sm:$0xf]
  %v1647 = vld [vmem:[%s1 + $0x17e8] sm:$0xf]
  %v1648 = vld [vmem:[%s1 + $0x17ec] sm:$0xf]
  %v1649 = vld [vmem:[%s1 + $0x17f0] sm:$0xf]
  %v1650 = vld [vmem:[%s1 + $0x17f4] sm:$0xf]
  %v1651 = vld [vmem:[%s1 + $0x17f8] sm:$0xf]
  %v1652 = vld [vmem:[%s1 + $0x17fc] sm:$0xf]
  %v1653 = vld [vmem:[%s1 + $0x1800] sm:$0xf]
  %v1654 = vld [vmem:[%s1 + $0x1804] sm:$0xf]
  %v1655 = vld [vmem:[%s1 + $0x1808] sm:$0xf]
  %v1656 = vld [vmem:[%s1 + $0x180c] sm:$0xf]
  %v1657 = vld [vmem:[%s1 + $0x1810] sm:$0xf]
  %v1658 = vld [vmem:[%s1 + $0x1814] sm:$0xf]
  %v1659 = vld [vmem:[%s1 + $0x1818] sm:$0xf]
  %v1660 = vld [vmem:[%s1 + $0x181c] sm:$0xf]
  %v1661 = vld [vmem:[%s1 + $0x1820] sm:$0xf]
  %v1662 = vld [vmem:[%s1 + $0x1824] sm:$0xf]
  %v1663 = vld [vmem:[%s1 + $0x1828] sm:$0xf]
  %v1664 = vld [vmem:[%s1 + $0x182c] sm:$0xf]
  %v1665 = vld [vmem:[%s1 + $0x1830] sm:$0xf]
  %v1666 = vld [vmem:[%s1 + $0x1834] sm:$0xf]
  %v1667 = vld [vmem:[%s1 + $0x1838] sm:$0xf]
  %v1668 = vld [vmem:[%s1 + $0x183c] sm:$0xf]
  %v1669 = vld [vmem:[%s1 + $0x1840] sm:$0xf]
  %v1670 = vld [vmem:[%s1 + $0x1844] sm:$0xf]
  %v1671 = vld [vmem:[%s1 + $0x1848] sm:$0xf]
  %v1672 = vld [vmem:[%s1 + $0x184c] sm:$0xf]
  %v1673 = vld [vmem:[%s1 + $0x1850] sm:$0xf]
  %v1674 = vld [vmem:[%s1 + $0x1854] sm:$0xf]
  %v1675 = vld [vmem:[%s1 + $0x1858] sm:$0xf]
  %v1676 = vld [vmem:[%s1 + $0x185c] sm:$0xf]
  %v1677 = vld [vmem:[%s1 + $0x1860] sm:$0xf]
  %v1678 = vld [vmem:[%s1 + $0x1864] sm:$0xf]
  %v1679 = vld [vmem:[%s1 + $0x1868] sm:$0xf]
  %v1680 = vld [vmem:[%s1 + $0x186c] sm:$0xf]
  %v1681 = vld [vmem:[%s1 + $0x1870] sm:$0xf]
  %v1682 = vld [vmem:[%s1 + $0x1874] sm:$0xf]
  %v1683 = vld [vmem:[%s1 + $0x1878] sm:$0xf]
  %v1684 = vld [vmem:[%s1 + $0x187c] sm:$0xf]
  %v1685 = vld [vmem:[%s1 + $0x1880] sm:$0xf]
  %v1686 = vld [vmem:[%s1 + $0x1884] sm:$0xf]
  %v1687 = vld [vmem:[%s1 + $0x1888] sm:$0xf]
  %v1688 = vld [vmem:[%s1 + $0x188c] sm:$0xf]
  %v1689 = vld [vmem:[%s1 + $0x1890] sm:$0xf]
  %v1690 = vld [vmem:[%s1 + $0x1894] sm:$0xf]
  %v1691 = vld [vmem:[%s1 + $0x1898] sm:$0xf]
  %v1692 = vld [vmem:[%s1 + $0x189c] sm:$0xf]
  %v1693 = vld [vmem:[%s1 + $0x18a0] sm:$0xf]
  %v1694 = vld [vmem:[%s1 + $0x18a4] sm:$0xf]
  %v1695 = vld [vmem:[%s1 + $0x18a8] sm:$0xf]
  %v1696 = vld [vmem:[%s1 + $0x18ac] sm:$0xf]
  %v1697 = vld [vmem:[%s1 + $0x18b0] sm:$0xf]
  %v1698 = vld [vmem:[%s1 + $0x18b4] sm:$0xf]
  %v1699 = vld [vmem:[%s1 + $0x18b8] sm:$0xf]
  %v1700 = vld [vmem:[%s1 + $0x18bc] sm:$0xf]
  %v1701 = vld [vmem:[%s1 + $0x18c0] sm:$0xf]
  %v1702 = vld [vmem:[%s1 + $0x18c4] sm:$0xf]
  %v1703 = vld [vmem:[%s1 + $0x18c8] sm:$0xf]
  %v1704 = vld [vmem:[%s1 + $0x18cc] sm:$0xf]
  %v1705 = vld [vmem:[%s1 + $0x18d0] sm:$0xf]
  %v1706 = vld [vmem:[%s1 + $0x18d4] sm:$0xf]
  %v1707 = vld [vmem:[%s1 + $0x18d8] sm:$0xf]
  %v1708 = vld [vmem:[%s1 + $0x18dc] sm:$0xf]
  %v1709 = vld [vmem:[%s1 + $0x18e0] sm:$0xf]
  %v1710 = vld [vmem:[%s1 + $0x18e4] sm:$0xf]
  %v1711 = vld [vmem:[%s1 + $0x18e8] sm:$0xf]
  %v1712 = vld [vmem:[%s1 + $0x18ec] sm:$0xf]
  %v1713 = vld [vmem:[%s1 + $0x18f0] sm:$0xf]
  %v1714 = vld [vmem:[%s1 + $0x18f4] sm:$0xf]
  %v1715 = vld [vmem:[%s1 + $0x18f8] sm:$0xf]
  %v1716 = vld [vmem:[%s1 + $0x18fc] sm:$0xf]
  %v1817 = vunpack.c.l.b16 %v17
  %v1818 = vunpack.c.h.b16 %v17
  %v1819 = vunpack.c.l.b16 %v18
  %v1820 = vunpack.c.h.b16 %v18
  %v1821 = vunpack.c.l.b16 %v19
  %v1822 = vunpack.c.h.b16 %v19
  %v1823 = vunpack.c.l.b16 %v20
  %v1824 = vunpack.c.h.b16 %v20
  %v1825 = vunpack.c.l.b16 %v21
  %v1826 = vunpack.c.h.b16 %v21
  %v1827 = vunpack.c.l.b16 %v22
  %v1828 = vunpack.c.h.b16 %v22
  %v1829 = vunpack.c.l.b16 %v23
  %v1830 = vunpack.c.h.b16 %v23
  %v1831 = vunpack.c.l.b16 %v24
  %v1832 = vunpack.c.h.b16 %v24
  %v1833 = vunpack.c.l.b16 %v25
  %v1834 = vunpack.c.h.b16 %v25
  %v1835 = vunpack.c.l.b16 %v26
  %v1836 = vunpack.c.h.b16 %v26
  %v1837 = vunpack.c.l.b16 %v27
  %v1838 = vunpack.c.h.b16 %v27
  %v1839 = vunpack.c.l.b16 %v28
  %v1840 = vunpack.c.h.b16 %v28
  %v1841 = vunpack.c.l.b16 %v29
  %v1842 = vunpack.c.h.b16 %v29
  %v1843 = vunpack.c.l.b16 %v30
  %v1844 = vunpack.c.h.b16 %v30
  %v1845 = vunpack.c.l.b16 %v31
  %v1846 = vunpack.c.h.b16 %v31
  %v1847 = vunpack.c.l.b16 %v32
  %v1848 = vunpack.c.h.b16 %v32
  %v1849 = vunpack.c.l.b16 %v33
  %v1850 = vunpack.c.h.b16 %v33
  %v1851 = vunpack.c.l.b16 %v34
  %v1852 = vunpack.c.h.b16 %v34
  %v1853 = vunpack.c.l.b16 %v35
  %v1854 = vunpack.c.h.b16 %v35
  %v1855 = vunpack.c.l.b16 %v36
  %v1856 = vunpack.c.h.b16 %v36
  %v1857 = vunpack.c.l.b16 %v37
  %v1858 = vunpack.c.h.b16 %v37
  %v1859 = vunpack.c.l.b16 %v38
  %v1860 = vunpack.c.h.b16 %v38
  %v1861 = vunpack.c.l.b16 %v39
  %v1862 = vunpack.c.h.b16 %v39
  %v1863 = vunpack.c.l.b16 %v40
  %v1864 = vunpack.c.h.b16 %v40
  %v1865 = vunpack.c.l.b16 %v41
  %v1866 = vunpack.c.h.b16 %v41
  %v1867 = vunpack.c.l.b16 %v42
  %v1868 = vunpack.c.h.b16 %v42
  %v1869 = vunpack.c.l.b16 %v43
  %v1870 = vunpack.c.h.b16 %v43
  %v1871 = vunpack.c.l.b16 %v44
  %v1872 = vunpack.c.h.b16 %v44
  %v1873 = vunpack.c.l.b16 %v45
  %v1874 = vunpack.c.h.b16 %v45
  %v1875 = vunpack.c.l.b16 %v46
  %v1876 = vunpack.c.h.b16 %v46
  %v1877 = vunpack.c.l.b16 %v47
  %v1878 = vunpack.c.h.b16 %v47
  %v1879 = vunpack.c.l.b16 %v48
  %v1880 = vunpack.c.h.b16 %v48
  %v1881 = vunpack.c.l.b16 %v49
  %v1882 = vunpack.c.h.b16 %v49
  %v1883 = vunpack.c.l.b16 %v50
  %v1884 = vunpack.c.h.b16 %v50
  %v1885 = vunpack.c.l.b16 %v51
  %v1886 = vunpack.c.h.b16 %v51
  %v1887 = vunpack.c.l.b16 %v52
  %v1888 = vunpack.c.h.b16 %v52
  %v1889 = vunpack.c.l.b16 %v53
  %v1890 = vunpack.c.h.b16 %v53
  %v1891 = vunpack.c.l.b16 %v54
  %v1892 = vunpack.c.h.b16 %v54
  %v1893 = vunpack.c.l.b16 %v55
  %v1894 = vunpack.c.h.b16 %v55
  %v1895 = vunpack.c.l.b16 %v56
  %v1896 = vunpack.c.h.b16 %v56
  %v1897 = vunpack.c.l.b16 %v57
  %v1898 = vunpack.c.h.b16 %v57
  %v1899 = vunpack.c.l.b16 %v58
  %v1900 = vunpack.c.h.b16 %v58
  %v1901 = vunpack.c.l.b16 %v59
  %v1902 = vunpack.c.h.b16 %v59
  %v1903 = vunpack.c.l.b16 %v60
  %v1904 = vunpack.c.h.b16 %v60
  %v1905 = vunpack.c.l.b16 %v61
  %v1906 = vunpack.c.h.b16 %v61
  %v1907 = vunpack.c.l.b16 %v62
  %v1908 = vunpack.c.h.b16 %v62
  %v1909 = vunpack.c.l.b16 %v63
  %v1910 = vunpack.c.h.b16 %v63
  %v1911 = vunpack.c.l.b16 %v64
  %v1912 = vunpack.c.h.b16 %v64
  %v1913 = vunpack.c.l.b16 %v65
  %v1914 = vunpack.c.h.b16 %v65
  %v1915 = vunpack.c.l.b16 %v66
  %v1916 = vunpack.c.h.b16 %v66
  %v1917 = vunpack.c.l.b16 %v67
  %v1918 = vunpack.c.h.b16 %v67
  %v1919 = vunpack.c.l.b16 %v68
  %v1920 = vunpack.c.h.b16 %v68
  %v1921 = vunpack.c.l.b16 %v69
  %v1922 = vunpack.c.h.b16 %v69
  %v1923 = vunpack.c.l.b16 %v70
  %v1924 = vunpack.c.h.b16 %v70
  %v1925 = vunpack.c.l.b16 %v71
  %v1926 = vunpack.c.h.b16 %v71
  %v1927 = vunpack.c.l.b16 %v72
  %v1928 = vunpack.c.h.b16 %v72
  %v1929 = vunpack.c.l.b16 %v73
  %v1930 = vunpack.c.h.b16 %v73
  %v1931 = vunpack.c.l.b16 %v74
  %v1932 = vunpack.c.h.b16 %v74
  %v1933 = vunpack.c.l.b16 %v75
  %v1934 = vunpack.c.h.b16 %v75
  %v1935 = vunpack.c.l.b16 %v76
  %v1936 = vunpack.c.h.b16 %v76
  %v1937 = vunpack.c.l.b16 %v77
  %v1938 = vunpack.c.h.b16 %v77
  %v1939 = vunpack.c.l.b16 %v78
  %v1940 = vunpack.c.h.b16 %v78
  %v1941 = vunpack.c.l.b16 %v79
  %v1942 = vunpack.c.h.b16 %v79
  %v1943 = vunpack.c.l.b16 %v80
  %v1944 = vunpack.c.h.b16 %v80
  %v1945 = vunpack.c.l.b16 %v81
  %v1946 = vunpack.c.h.b16 %v81
  %v1947 = vunpack.c.l.b16 %v82
  %v1948 = vunpack.c.h.b16 %v82
  %v1949 = vunpack.c.l.b16 %v83
  %v1950 = vunpack.c.h.b16 %v83
  %v1951 = vunpack.c.l.b16 %v84
  %v1952 = vunpack.c.h.b16 %v84
  %v1953 = vunpack.c.l.b16 %v85
  %v1954 = vunpack.c.h.b16 %v85
  %v1955 = vunpack.c.l.b16 %v86
  %v1956 = vunpack.c.h.b16 %v86
  %v1957 = vunpack.c.l.b16 %v87
  %v1958 = vunpack.c.h.b16 %v87
  %v1959 = vunpack.c.l.b16 %v88
  %v1960 = vunpack.c.h.b16 %v88
  %v1961 = vunpack.c.l.b16 %v89
  %v1962 = vunpack.c.h.b16 %v89
  %v1963 = vunpack.c.l.b16 %v90
  %v1964 = vunpack.c.h.b16 %v90
  %v1965 = vunpack.c.l.b16 %v91
  %v1966 = vunpack.c.h.b16 %v91
  %v1967 = vunpack.c.l.b16 %v92
  %v1968 = vunpack.c.h.b16 %v92
  %v1969 = vunpack.c.l.b16 %v93
  %v1970 = vunpack.c.h.b16 %v93
  %v1971 = vunpack.c.l.b16 %v94
  %v1972 = vunpack.c.h.b16 %v94
  %v1973 = vunpack.c.l.b16 %v95
  %v1974 = vunpack.c.h.b16 %v95
  %v1975 = vunpack.c.l.b16 %v96
  %v1976 = vunpack.c.h.b16 %v96
  %v1977 = vunpack.c.l.b16 %v97
  %v1978 = vunpack.c.h.b16 %v97
  %v1979 = vunpack.c.l.b16 %v98
  %v1980 = vunpack.c.h.b16 %v98
  %v1981 = vunpack.c.l.b16 %v99
  %v1982 = vunpack.c.h.b16 %v99
  %v1983 = vunpack.c.l.b16 %v100
  %v1984 = vunpack.c.h.b16 %v100
  %v1985 = vunpack.c.l.b16 %v101
  %v1986 = vunpack.c.h.b16 %v101
  %v1987 = vunpack.c.l.b16 %v102
  %v1988 = vunpack.c.h.b16 %v102
  %v1989 = vunpack.c.l.b16 %v103
  %v1990 = vunpack.c.h.b16 %v103
  %v1991 = vunpack.c.l.b16 %v104
  %v1992 = vunpack.c.h.b16 %v104
  %v1993 = vunpack.c.l.b16 %v105
  %v1994 = vunpack.c.h.b16 %v105
  %v1995 = vunpack.c.l.b16 %v106
  %v1996 = vunpack.c.h.b16 %v106
  %v1997 = vunpack.c.l.b16 %v107
  %v1998 = vunpack.c.h.b16 %v107
  %v1999 = vunpack.c.l.b16 %v108
  %v2000 = vunpack.c.h.b16 %v108
  %v2001 = vunpack.c.l.b16 %v109
  %v2002 = vunpack.c.h.b16 %v109
  %v2003 = vunpack.c.l.b16 %v110
  %v2004 = vunpack.c.h.b16 %v110
  %v2005 = vunpack.c.l.b16 %v111
  %v2006 = vunpack.c.h.b16 %v111
  %v2007 = vunpack.c.l.b16 %v112
  %v2008 = vunpack.c.h.b16 %v112
  %v2009 = vunpack.c.l.b16 %v113
  %v2010 = vunpack.c.h.b16 %v113
  %v2011 = vunpack.c.l.b16 %v114
  %v2012 = vunpack.c.h.b16 %v114
  %v2013 = vunpack.c.l.b16 %v115
  %v2014 = vunpack.c.h.b16 %v115
  %v2015 = vunpack.c.l.b16 %v116
  %v2016 = vunpack.c.h.b16 %v116
  %v2017 = vpack.c.b16 %v1917, %v1817
  %v2018 = vpack.c.b16 %v1918, %v1818
  %v2019 = vpack.c.b16 %v1919, %v1819
  %v2020 = vpack.c.b16 %v1920, %v1820
  %v2021 = vpack.c.b16 %v1921, %v1821
  %v2022 = vpack.c.b16 %v1922, %v1822
  %v2023 = vpack.c.b16 %v1923, %v1823
  %v2024 = vpack.c.b16 %v1924, %v1824
  %v2025 = vpack.c.b16 %v1925, %v1825
  %v2026 = vpack.c.b16 %v1926, %v1826
  %v2027 = vpack.c.b16 %v1927, %v1827
  %v2028 = vpack.c.b16 %v1928, %v1828
  %v2029 = vpack.c.b16 %v1929, %v1829
  %v2030 = vpack.c.b16 %v1930, %v1830
  %v2031 = vpack.c.b16 %v1931, %v1831
  %v2032 = vpack.c.b16 %v1932, %v1832
  %v2033 = vpack.c.b16 %v1933, %v1833
  %v2034 = vpack.c.b16 %v1934, %v1834
  %v2035 = vpack.c.b16 %v1935, %v1835
  %v2036 = vpack.c.b16 %v1936, %v1836
  %v2037 = vpack.c.b16 %v1937, %v1837
  %v2038 = vpack.c.b16 %v1938, %v1838
  %v2039 = vpack.c.b16 %v1939, %v1839
  %v2040 = vpack.c.b16 %v1940, %v1840
  %v2041 = vpack.c.b16 %v1941, %v1841
  %v2042 = vpack.c.b16 %v1942, %v1842
  %v2043 = vpack.c.b16 %v1943, %v1843
  %v2044 = vpack.c.b16 %v1944, %v1844
  %v2045 = vpack.c.b16 %v1945, %v1845
  %v2046 = vpack.c.b16 %v1946, %v1846
  %v2047 = vpack.c.b16 %v1947, %v1847
  %v2048 = vpack.c.b16 %v1948, %v1848
  %v2049 = vpack.c.b16 %v1949, %v1849
  %v2050 = vpack.c.b16 %v1950, %v1850
  %v2051 = vpack.c.b16 %v1951, %v1851
  %v2052 = vpack.c.b16 %v1952, %v1852
  %v2053 = vpack.c.b16 %v1953, %v1853
  %v2054 = vpack.c.b16 %v1954, %v1854
  %v2055 = vpack.c.b16 %v1955, %v1855
  %v2056 = vpack.c.b16 %v1956, %v1856
  %v2057 = vpack.c.b16 %v1957, %v1857
  %v2058 = vpack.c.b16 %v1958, %v1858
  %v2059 = vpack.c.b16 %v1959, %v1859
  %v2060 = vpack.c.b16 %v1960, %v1860
  %v2061 = vpack.c.b16 %v1961, %v1861
  %v2062 = vpack.c.b16 %v1962, %v1862
  %v2063 = vpack.c.b16 %v1963, %v1863
  %v2064 = vpack.c.b16 %v1964, %v1864
  %v2065 = vpack.c.b16 %v1965, %v1865
  %v2066 = vpack.c.b16 %v1966, %v1866
  %v2067 = vpack.c.b16 %v1967, %v1867
  %v2068 = vpack.c.b16 %v1968, %v1868
  %v2069 = vpack.c.b16 %v1969, %v1869
  %v2070 = vpack.c.b16 %v1970, %v1870
  %v2071 = vpack.c.b16 %v1971, %v1871
  %v2072 = vpack.c.b16 %v1972, %v1872
  %v2073 = vpack.c.b16 %v1973, %v1873
  %v2074 = vpack.c.b16 %v1974, %v1874
  %v2075 = vpack.c.b16 %v1975, %v1875
  %v2076 = vpack.c.b16 %v1976, %v1876
  %v2077 = vpack.c.b16 %v1977, %v1877
  %v2078 = vpack.c.b16 %v1978, %v1878
  %v2079 = vpack.c.b16 %v1979, %v1879
  %v2080 = vpack.c.b16 %v1980, %v1880
  %v2081 = vpack.c.b16 %v1981, %v1881
  %v2082 = vpack.c.b16 %v1982, %v1882
  %v2083 = vpack.c.b16 %v1983, %v1883
  %v2084 = vpack.c.b16 %v1984, %v1884
  %v2085 = vpack.c.b16 %v1985, %v1885
  %v2086 = vpack.c.b16 %v1986, %v1886
  %v2087 = vpack.c.b16 %v1987, %v1887
  %v2088 = vpack.c.b16 %v1988, %v1888
  %v2089 = vpack.c.b16 %v1989, %v1889
  %v2090 = vpack.c.b16 %v1990, %v1890
  %v2091 = vpack.c.b16 %v1991, %v1891
  %v2092 = vpack.c.b16 %v1992, %v1892
  %v2093 = vpack.c.b16 %v1993, %v1893
  %v2094 = vpack.c.b16 %v1994, %v1894
  %v2095 = vpack.c.b16 %v1995, %v1895
  %v2096 = vpack.c.b16 %v1996, %v1896
  %v2097 = vpack.c.b16 %v1997, %v1897
  %v2098 = vpack.c.b16 %v1998, %v1898
  %v2099 = vpack.c.b16 %v1999, %v1899
  %v2100 = vpack.c.b16 %v2000, %v1900
  %v2101 = vpack.c.b16 %v2001, %v1901
  %v2102 = vpack.c.b16 %v2002, %v1902
  %v2103 = vpack.c.b16 %v2003, %v1903
  %v2104 = vpack.c.b16 %v2004, %v1904
  %v2105 = vpack.c.b16 %v2005, %v1905
  %v2106 = vpack.c.b16 %v2006, %v1906
  %v2107 = vpack.c.b16 %v2007, %v1907
  %v2108 = vpack.c.b16 %v2008, %v1908
  %v2109 = vpack.c.b16 %v2009, %v1909
  %v2110 = vpack.c.b16 %v2010, %v1910
  %v2111 = vpack.c.b16 %v2011, %v1911
  %v2112 = vpack.c.b16 %v2012, %v1912
  %v2113 = vpack.c.b16 %v2013, %v1913
  %v2114 = vpack.c.b16 %v2014, %v1914
  %v2115 = vpack.c.b16 %v2015, %v1915
  %v2116 = vpack.c.b16 %v2016, %v1916
  %v3817 = vunpack.c.l.b16 %v117
  %v3818 = vunpack.c.l.b16 %v118
  %v3819 = vunpack.c.l.b16 %v119
  %v3820 = vunpack.c.l.b16 %v120
  %v3821 = vunpack.c.l.b16 %v121
  %v3822 = vunpack.c.l.b16 %v122
  %v3823 = vunpack.c.l.b16 %v123
  %v3824 = vunpack.c.l.b16 %v124
  %v3825 = vunpack.c.l.b16 %v125
  %v3826 = vunpack.c.l.b16 %v126
  %v3827 = vunpack.c.l.b16 %v127
  %v3828 = vunpack.c.l.b16 %v128
  %v3829 = vunpack.c.l.b16 %v129
  %v3830 = vunpack.c.l.b16 %v130
  %v3831 = vunpack.c.l.b16 %v131
  %v3832 = vunpack.c.l.b16 %v132
  %v3833 = vunpack.c.l.b16 %v133
  %v3834 = vunpack.c.l.b16 %v134
  %v3835 = vunpack.c.l.b16 %v135
  %v3836 = vunpack.c.l.b16 %v136
  %v3837 = vunpack.c.l.b16 %v137
  %v3838 = vunpack.c.l.b16 %v138
  %v3839 = vunpack.c.l.b16 %v139
  %v3840 = vunpack.c.l.b16 %v140
  %v3841 = vunpack.c.l.b16 %v141
  %v3842 = vunpack.c.l.b16 %v142
  %v3843 = vunpack.c.l.b16 %v143
  %v3844 = vunpack.c.l.b16 %v144
  %v3845 = vunpack.c.l.b16 %v145
  %v3846 = vunpack.c.l.b16 %v146
  %v3847 = vunpack.c.l.b16 %v147
  %v3848 = vunpack.c.l.b16 %v148
  %v3849 = vunpack.c.l.b16 %v149
  %v3850 = vunpack.c.l.b16 %v150
  %v3851 = vunpack.c.l.b16 %v151
  %v3852 = vunpack.c.l.b16 %v152
  %v3853 = vunpack.c.l.b16 %v153
  %v3854 = vunpack.c.l.b16 %v154
  %v3855 = vunpack.c.l.b16 %v155
  %v3856 = vunpack.c.l.b16 %v156
  %v3857 = vunpack.c.l.b16 %v157
  %v3858 = vunpack.c.l.b16 %v158
  %v3859 = vunpack.c.l.b16 %v159
  %v3860 = vunpack.c.l.b16 %v160
  %v3861 = vunpack.c.l.b16 %v161
  %v3862 = vunpack.c.l.b16 %v162
  %v3863 = vunpack.c.l.b16 %v163
  %v3864 = vunpack.c.l.b16 %v164
  %v3865 = vunpack.c.l.b16 %v165
  %v3866 = vunpack.c.l.b16 %v166
  %v3867 = vunpack.c.l.b16 %v167
  %v3868 = vunpack.c.l.b16 %v168
  %v3869 = vunpack.c.l.b16 %v169
  %v3870 = vunpack.c.l.b16 %v170
  %v3871 = vunpack.c.l.b16 %v171
  %v3872 = vunpack.c.l.b16 %v172
  %v3873 = vunpack.c.l.b16 %v173
  %v3874 = vunpack.c.l.b16 %v174
  %v3875 = vunpack.c.l.b16 %v175
  %v3876 = vunpack.c.l.b16 %v176
  %v3877 = vunpack.c.l.b16 %v177
  %v3878 = vunpack.c.l.b16 %v178
  %v3879 = vunpack.c.l.b16 %v179
  %v3880 = vunpack.c.l.b16 %v180
  %v3881 = vunpack.c.l.b16 %v181
  %v3882 = vunpack.c.l.b16 %v182
  %v3883 = vunpack.c.l.b16 %v183
  %v3884 = vunpack.c.l.b16 %v184
  %v3885 = vunpack.c.l.b16 %v185
  %v3886 = vunpack.c.l.b16 %v186
  %v3887 = vunpack.c.l.b16 %v187
  %v3888 = vunpack.c.l.b16 %v188
  %v3889 = vunpack.c.l.b16 %v189
  %v3890 = vunpack.c.l.b16 %v190
  %v3891 = vunpack.c.l.b16 %v191
  %v3892 = vunpack.c.l.b16 %v192
  %v3893 = vunpack.c.l.b16 %v193
  %v3894 = vunpack.c.l.b16 %v194
  %v3895 = vunpack.c.l.b16 %v195
  %v3896 = vunpack.c.l.b16 %v196
  %v3897 = vunpack.c.l.b16 %v197
  %v3898 = vunpack.c.l.b16 %v198
  %v3899 = vunpack.c.l.b16 %v199
  %v3900 = vunpack.c.l.b16 %v200
  %v3901 = vunpack.c.l.b16 %v201
  %v3902 = vunpack.c.l.b16 %v202
  %v3903 = vunpack.c.l.b16 %v203
  %v3904 = vunpack.c.l.b16 %v204
  %v3905 = vunpack.c.l.b16 %v205
  %v3906 = vunpack.c.l.b16 %v206
  %v3907 = vunpack.c.l.b16 %v207
  %v3908 = vunpack.c.l.b16 %v208
  %v3909 = vunpack.c.l.b16 %v209
  %v3910 = vunpack.c.l.b16 %v210
  %v3911 = vunpack.c.l.b16 %v211
  %v3912 = vunpack.c.l.b16 %v212
  %v3913 = vunpack.c.l.b16 %v213
  %v3914 = vunpack.c.l.b16 %v214
  %v3915 = vunpack.c.l.b16 %v215
  %v3916 = vunpack.c.l.b16 %v216
  %v3917 = vunpack.c.l.b16 %v217
  %v3918 = vunpack.c.l.b16 %v218
  %v3919 = vunpack.c.l.b16 %v219
  %v3920 = vunpack.c.l.b16 %v220
  %v3921 = vunpack.c.l.b16 %v221
  %v3922 = vunpack.c.l.b16 %v222
  %v3923 = vunpack.c.l.b16 %v223
  %v3924 = vunpack.c.l.b16 %v224
  %v3925 = vunpack.c.l.b16 %v225
  %v3926 = vunpack.c.l.b16 %v226
  %v3927 = vunpack.c.l.b16 %v227
  %v3928 = vunpack.c.l.b16 %v228
  %v3929 = vunpack.c.l.b16 %v229
  %v3930 = vunpack.c.l.b16 %v230
  %v3931 = vunpack.c.l.b16 %v231
  %v3932 = vunpack.c.l.b16 %v232
  %v3933 = vunpack.c.l.b16 %v233
  %v3934 = vunpack.c.l.b16 %v234
  %v3935 = vunpack.c.l.b16 %v235
  %v3936 = vunpack.c.l.b16 %v236
  %v3937 = vunpack.c.l.b16 %v237
  %v3938 = vunpack.c.l.b16 %v238
  %v3939 = vunpack.c.l.b16 %v239
  %v3940 = vunpack.c.l.b16 %v240
  %v3941 = vunpack.c.l.b16 %v241
  %v3942 = vunpack.c.l.b16 %v242
  %v3943 = vunpack.c.l.b16 %v243
  %v3944 = vunpack.c.l.b16 %v244
  %v3945 = vunpack.c.l.b16 %v245
  %v3946 = vunpack.c.l.b16 %v246
  %v3947 = vunpack.c.l.b16 %v247
  %v3948 = vunpack.c.l.b16 %v248
  %v3949 = vunpack.c.l.b16 %v249
  %v3950 = vunpack.c.l.b16 %v250
  %v3951 = vunpack.c.l.b16 %v251
  %v3952 = vunpack.c.l.b16 %v252
  %v3953 = vunpack.c.l.b16 %v253
  %v3954 = vunpack.c.l.b16 %v254
  %v3955 = vunpack.c.l.b16 %v255
  %v3956 = vunpack.c.l.b16 %v256
  %v3957 = vunpack.c.l.b16 %v257
  %v3958 = vunpack.c.l.b16 %v258
  %v3959 = vunpack.c.l.b16 %v259
  %v3960 = vunpack.c.l.b16 %v260
  %v3961 = vunpack.c.l.b16 %v261
  %v3962 = vunpack.c.l.b16 %v262
  %v3963 = vunpack.c.l.b16 %v263
  %v3964 = vunpack.c.l.b16 %v264
  %v3965 = vunpack.c.l.b16 %v265
  %v3966 = vunpack.c.l.b16 %v266
  %v3967 = vunpack.c.l.b16 %v267
  %v3968 = vunpack.c.l.b16 %v268
  %v3969 = vunpack.c.l.b16 %v269
  %v3970 = vunpack.c.l.b16 %v270
  %v3971 = vunpack.c.l.b16 %v271
  %v3972 = vunpack.c.l.b16 %v272
  %v3973 = vunpack.c.l.b16 %v273
  %v3974 = vunpack.c.l.b16 %v274
  %v3975 = vunpack.c.l.b16 %v275
  %v3976 = vunpack.c.l.b16 %v276
  %v3977 = vunpack.c.l.b16 %v277
  %v3978 = vunpack.c.l.b16 %v278
  %v3979 = vunpack.c.l.b16 %v279
  %v3980 = vunpack.c.l.b16 %v280
  %v3981 = vunpack.c.l.b16 %v281
  %v3982 = vunpack.c.l.b16 %v282
  %v3983 = vunpack.c.l.b16 %v283
  %v3984 = vunpack.c.l.b16 %v284
  %v3985 = vunpack.c.l.b16 %v285
  %v3986 = vunpack.c.l.b16 %v286
  %v3987 = vunpack.c.l.b16 %v287
  %v3988 = vunpack.c.l.b16 %v288
  %v3989 = vunpack.c.l.b16 %v289
  %v3990 = vunpack.c.l.b16 %v290
  %v3991 = vunpack.c.l.b16 %v291
  %v3992 = vunpack.c.l.b16 %v292
  %v3993 = vunpack.c.l.b16 %v293
  %v3994 = vunpack.c.l.b16 %v294
  %v3995 = vunpack.c.l.b16 %v295
  %v3996 = vunpack.c.l.b16 %v296
  %v3997 = vunpack.c.l.b16 %v297
  %v3998 = vunpack.c.l.b16 %v298
  %v3999 = vunpack.c.l.b16 %v299
  %v4000 = vunpack.c.l.b16 %v300
  %v4001 = vunpack.c.l.b16 %v301
  %v4002 = vunpack.c.l.b16 %v302
  %v4003 = vunpack.c.l.b16 %v303
  %v4004 = vunpack.c.l.b16 %v304
  %v4005 = vunpack.c.l.b16 %v305
  %v4006 = vunpack.c.l.b16 %v306
  %v4007 = vunpack.c.l.b16 %v307
  %v4008 = vunpack.c.l.b16 %v308
  %v4009 = vunpack.c.l.b16 %v309
  %v4010 = vunpack.c.l.b16 %v310
  %v4011 = vunpack.c.l.b16 %v311
  %v4012 = vunpack.c.l.b16 %v312
  %v4013 = vunpack.c.l.b16 %v313
  %v4014 = vunpack.c.l.b16 %v314
  %v4015 = vunpack.c.l.b16 %v315
  %v4016 = vunpack.c.l.b16 %v316
  %v4017 = vunpack.c.l.b16 %v317
  %v4018 = vunpack.c.l.b16 %v318
  %v4019 = vunpack.c.l.b16 %v319
  %v4020 = vunpack.c.l.b16 %v320
  %v4021 = vunpack.c.l.b16 %v321
  %v4022 = vunpack.c.l.b16 %v322
  %v4023 = vunpack.c.l.b16 %v323
  %v4024 = vunpack.c.l.b16 %v324
  %v4025 = vunpack.c.l.b16 %v325
  %v4026 = vunpack.c.l.b16 %v326
  %v4027 = vunpack.c.l.b16 %v327
  %v4028 = vunpack.c.l.b16 %v328
  %v4029 = vunpack.c.l.b16 %v329
  %v4030 = vunpack.c.l.b16 %v330
  %v4031 = vunpack.c.l.b16 %v331
  %v4032 = vunpack.c.l.b16 %v332
  %v4033 = vunpack.c.l.b16 %v333
  %v4034 = vunpack.c.l.b16 %v334
  %v4035 = vunpack.c.l.b16 %v335
  %v4036 = vunpack.c.l.b16 %v336
  %v4037 = vunpack.c.l.b16 %v337
  %v4038 = vunpack.c.l.b16 %v338
  %v4039 = vunpack.c.l.b16 %v339
  %v4040 = vunpack.c.l.b16 %v340
  %v4041 = vunpack.c.l.b16 %v341
  %v4042 = vunpack.c.l.b16 %v342
  %v4043 = vunpack.c.l.b16 %v343
  %v4044 = vunpack.c.l.b16 %v344
  %v4045 = vunpack.c.l.b16 %v345
  %v4046 = vunpack.c.l.b16 %v346
  %v4047 = vunpack.c.l.b16 %v347
  %v4048 = vunpack.c.l.b16 %v348
  %v4049 = vunpack.c.l.b16 %v349
  %v4050 = vunpack.c.l.b16 %v350
  %v4051 = vunpack.c.l.b16 %v351
  %v4052 = vunpack.c.l.b16 %v352
  %v4053 = vunpack.c.l.b16 %v353
  %v4054 = vunpack.c.l.b16 %v354
  %v4055 = vunpack.c.l.b16 %v355
  %v4056 = vunpack.c.l.b16 %v356
  %v4057 = vunpack.c.l.b16 %v357
  %v4058 = vunpack.c.l.b16 %v358
  %v4059 = vunpack.c.l.b16 %v359
  %v4060 = vunpack.c.l.b16 %v360
  %v4061 = vunpack.c.l.b16 %v361
  %v4062 = vunpack.c.l.b16 %v362
  %v4063 = vunpack.c.l.b16 %v363
  %v4064 = vunpack.c.l.b16 %v364
  %v4065 = vunpack.c.l.b16 %v365
  %v4066 = vunpack.c.l.b16 %v366
  %v4067 = vunpack.c.l.b16 %v367
  %v4068 = vunpack.c.l.b16 %v368
  %v4069 = vunpack.c.l.b16 %v369
  %v4070 = vunpack.c.l.b16 %v370
  %v4071 = vunpack.c.l.b16 %v371
  %v4072 = vunpack.c.l.b16 %v372
  %v4073 = vunpack.c.l.b16 %v373
  %v4074 = vunpack.c.l.b16 %v374
  %v4075 = vunpack.c.l.b16 %v375
  %v4076 = vunpack.c.l.b16 %v376
  %v4077 = vunpack.c.l.b16 %v377
  %v4078 = vunpack.c.l.b16 %v378
  %v4079 = vunpack.c.l.b16 %v379
  %v4080 = vunpack.c.l.b16 %v380
  %v4081 = vunpack.c.l.b16 %v381
  %v4082 = vunpack.c.l.b16 %v382
  %v4083 = vunpack.c.l.b16 %v383
  %v4084 = vunpack.c.l.b16 %v384
  %v4085 = vunpack.c.l.b16 %v385
  %v4086 = vunpack.c.l.b16 %v386
  %v4087 = vunpack.c.l.b16 %v387
  %v4088 = vunpack.c.l.b16 %v388
  %v4089 = vunpack.c.l.b16 %v389
  %v4090 = vunpack.c.l.b16 %v390
  %v4091 = vunpack.c.l.b16 %v391
  %v4092 = vunpack.c.l.b16 %v392
  %v4093 = vunpack.c.l.b16 %v393
  %v4094 = vunpack.c.l.b16 %v394
  %v4095 = vunpack.c.l.b16 %v395
  %v4096 = vunpack.c.l.b16 %v396
  %v4097 = vunpack.c.l.b16 %v397
  %v4098 = vunpack.c.l.b16 %v398
  %v4099 = vunpack.c.l.b16 %v399
  %v4100 = vunpack.c.l.b16 %v400
  %v4101 = vunpack.c.l.b16 %v401
  %v4102 = vunpack.c.l.b16 %v402
  %v4103 = vunpack.c.l.b16 %v403
  %v4104 = vunpack.c.l.b16 %v404
  %v4105 = vunpack.c.l.b16 %v405
  %v4106 = vunpack.c.l.b16 %v406
  %v4107 = vunpack.c.l.b16 %v407
  %v4108 = vunpack.c.l.b16 %v408
  %v4109 = vunpack.c.l.b16 %v409
  %v4110 = vunpack.c.l.b16 %v410
  %v4111 = vunpack.c.l.b16 %v411
  %v4112 = vunpack.c.l.b16 %v412
  %v4113 = vunpack.c.l.b16 %v413
  %v4114 = vunpack.c.l.b16 %v414
  %v4115 = vunpack.c.l.b16 %v415
  %v4116 = vunpack.c.l.b16 %v416
  %v4117 = vunpack.c.l.b16 %v417
  %v4118 = vunpack.c.l.b16 %v418
  %v4119 = vunpack.c.l.b16 %v419
  %v4120 = vunpack.c.l.b16 %v420
  %v4121 = vunpack.c.l.b16 %v421
  %v4122 = vunpack.c.l.b16 %v422
  %v4123 = vunpack.c.l.b16 %v423
  %v4124 = vunpack.c.l.b16 %v424
  %v4125 = vunpack.c.l.b16 %v425
  %v4126 = vunpack.c.l.b16 %v426
  %v4127 = vunpack.c.l.b16 %v427
  %v4128 = vunpack.c.l.b16 %v428
  %v4129 = vunpack.c.l.b16 %v429
  %v4130 = vunpack.c.l.b16 %v430
  %v4131 = vunpack.c.l.b16 %v431
  %v4132 = vunpack.c.l.b16 %v432
  %v4133 = vunpack.c.l.b16 %v433
  %v4134 = vunpack.c.l.b16 %v434
  %v4135 = vunpack.c.l.b16 %v435
  %v4136 = vunpack.c.l.b16 %v436
  %v4137 = vunpack.c.l.b16 %v437
  %v4138 = vunpack.c.l.b16 %v438
  %v4139 = vunpack.c.l.b16 %v439
  %v4140 = vunpack.c.l.b16 %v440
  %v4141 = vunpack.c.l.b16 %v441
  %v4142 = vunpack.c.l.b16 %v442
  %v4143 = vunpack.c.l.b16 %v443
  %v4144 = vunpack.c.l.b16 %v444
  %v4145 = vunpack.c.l.b16 %v445
  %v4146 = vunpack.c.l.b16 %v446
  %v4147 = vunpack.c.l.b16 %v447
  %v4148 = vunpack.c.l.b16 %v448
  %v4149 = vunpack.c.l.b16 %v449
  %v4150 = vunpack.c.l.b16 %v450
  %v4151 = vunpack.c.l.b16 %v451
  %v4152 = vunpack.c.l.b16 %v452
  %v4153 = vunpack.c.l.b16 %v453
  %v4154 = vunpack.c.l.b16 %v454
  %v4155 = vunpack.c.l.b16 %v455
  %v4156 = vunpack.c.l.b16 %v456
  %v4157 = vunpack.c.l.b16 %v457
  %v4158 = vunpack.c.l.b16 %v458
  %v4159 = vunpack.c.l.b16 %v459
  %v4160 = vunpack.c.l.b16 %v460
  %v4161 = vunpack.c.l.b16 %v461
  %v4162 = vunpack.c.l.b16 %v462
  %v4163 = vunpack.c.l.b16 %v463
  %v4164 = vunpack.c.l.b16 %v464
  %v4165 = vunpack.c.l.b16 %v465
  %v4166 = vunpack.c.l.b16 %v466
  %v4167 = vunpack.c.l.b16 %v467
  %v4168 = vunpack.c.l.b16 %v468
  %v4169 = vunpack.c.l.b16 %v469
  %v4170 = vunpack.c.l.b16 %v470
  %v4171 = vunpack.c.l.b16 %v471
  %v4172 = vunpack.c.l.b16 %v472
  %v4173 = vunpack.c.l.b16 %v473
  %v4174 = vunpack.c.l.b16 %v474
  %v4175 = vunpack.c.l.b16 %v475
  %v4176 = vunpack.c.l.b16 %v476
  %v4177 = vunpack.c.l.b16 %v477
  %v4178 = vunpack.c.l.b16 %v478
  %v4179 = vunpack.c.l.b16 %v479
  %v4180 = vunpack.c.l.b16 %v480
  %v4181 = vunpack.c.l.b16 %v481
  %v4182 = vunpack.c.l.b16 %v482
  %v4183 = vunpack.c.l.b16 %v483
  %v4184 = vunpack.c.l.b16 %v484
  %v4185 = vunpack.c.l.b16 %v485
  %v4186 = vunpack.c.l.b16 %v486
  %v4187 = vunpack.c.l.b16 %v487
  %v4188 = vunpack.c.l.b16 %v488
  %v4189 = vunpack.c.l.b16 %v489
  %v4190 = vunpack.c.l.b16 %v490
  %v4191 = vunpack.c.l.b16 %v491
  %v4192 = vunpack.c.l.b16 %v492
  %v4193 = vunpack.c.l.b16 %v493
  %v4194 = vunpack.c.l.b16 %v494
  %v4195 = vunpack.c.l.b16 %v495
  %v4196 = vunpack.c.l.b16 %v496
  %v4197 = vunpack.c.l.b16 %v497
  %v4198 = vunpack.c.l.b16 %v498
  %v4199 = vunpack.c.l.b16 %v499
  %v4200 = vunpack.c.l.b16 %v500
  %v4201 = vunpack.c.l.b16 %v501
  %v4202 = vunpack.c.l.b16 %v502
  %v4203 = vunpack.c.l.b16 %v503
  %v4204 = vunpack.c.l.b16 %v504
  %v4205 = vunpack.c.l.b16 %v505
  %v4206 = vunpack.c.l.b16 %v506
  %v4207 = vunpack.c.l.b16 %v507
  %v4208 = vunpack.c.l.b16 %v508
  %v4209 = vunpack.c.l.b16 %v509
  %v4210 = vunpack.c.l.b16 %v510
  %v4211 = vunpack.c.l.b16 %v511
  %v4212 = vunpack.c.l.b16 %v512
  %v4213 = vunpack.c.l.b16 %v513
  %v4214 = vunpack.c.l.b16 %v514
  %v4215 = vunpack.c.l.b16 %v515
  %v4216 = vunpack.c.l.b16 %v516
  %v4217 = vunpack.c.l.b16 %v517
  %v4218 = vunpack.c.l.b16 %v518
  %v4219 = vunpack.c.l.b16 %v519
  %v4220 = vunpack.c.l.b16 %v520
  %v4221 = vunpack.c.l.b16 %v521
  %v4222 = vunpack.c.l.b16 %v522
  %v4223 = vunpack.c.l.b16 %v523
  %v4224 = vunpack.c.l.b16 %v524
  %v4225 = vunpack.c.l.b16 %v525
  %v4226 = vunpack.c.l.b16 %v526
  %v4227 = vunpack.c.l.b16 %v527
  %v4228 = vunpack.c.l.b16 %v528
  %v4229 = vunpack.c.l.b16 %v529
  %v4230 = vunpack.c.l.b16 %v530
  %v4231 = vunpack.c.l.b16 %v531
  %v4232 = vunpack.c.l.b16 %v532
  %v4233 = vunpack.c.l.b16 %v533
  %v4234 = vunpack.c.l.b16 %v534
  %v4235 = vunpack.c.l.b16 %v535
  %v4236 = vunpack.c.l.b16 %v536
  %v4237 = vunpack.c.l.b16 %v537
  %v4238 = vunpack.c.l.b16 %v538
  %v4239 = vunpack.c.l.b16 %v539
  %v4240 = vunpack.c.l.b16 %v540
  %v4241 = vunpack.c.l.b16 %v541
  %v4242 = vunpack.c.l.b16 %v542
  %v4243 = vunpack.c.l.b16 %v543
  %v4244 = vunpack.c.l.b16 %v544
  %v4245 = vunpack.c.l.b16 %v545
  %v4246 = vunpack.c.l.b16 %v546
  %v4247 = vunpack.c.l.b16 %v547
  %v4248 = vunpack.c.l.b16 %v548
  %v4249 = vunpack.c.l.b16 %v549
  %v4250 = vunpack.c.l.b16 %v550
  %v4251 = vunpack.c.l.b16 %v551
  %v4252 = vunpack.c.l.b16 %v552
  %v4253 = vunpack.c.l.b16 %v553
  %v4254 = vunpack.c.l.b16 %v554
  %v4255 = vunpack.c.l.b16 %v555
  %v4256 = vunpack.c.l.b16 %v556
  %v4257 = vunpack.c.l.b16 %v557
  %v4258 = vunpack.c.l.b16 %v558
  %v4259 = vunpack.c.l.b16 %v559
  %v4260 = vunpack.c.l.b16 %v560
  %v4261 = vunpack.c.l.b16 %v561
  %v4262 = vunpack.c.l.b16 %v562
  %v4263 = vunpack.c.l.b16 %v563
  %v4264 = vunpack.c.l.b16 %v564
  %v4265 = vunpack.c.l.b16 %v565
  %v4266 = vunpack.c.l.b16 %v566
  %v4267 = vunpack.c.l.b16 %v567
  %v4268 = vunpack.c.l.b16 %v568
  %v4269 = vunpack.c.l.b16 %v569
  %v4270 = vunpack.c.l.b16 %v570
  %v4271 = vunpack.c.l.b16 %v571
  %v4272 = vunpack.c.l.b16 %v572
  %v4273 = vunpack.c.l.b16 %v573
  %v4274 = vunpack.c.l.b16 %v574
  %v4275 = vunpack.c.l.b16 %v575
  %v4276 = vunpack.c.l.b16 %v576
  %v4277 = vunpack.c.l.b16 %v577
  %v4278 = vunpack.c.l.b16 %v578
  %v4279 = vunpack.c.l.b16 %v579
  %v4280 = vunpack.c.l.b16 %v580
  %v4281 = vunpack.c.l.b16 %v581
  %v4282 = vunpack.c.l.b16 %v582
  %v4283 = vunpack.c.l.b16 %v583
  %v4284 = vunpack.c.l.b16 %v584
  %v4285 = vunpack.c.l.b16 %v585
  %v4286 = vunpack.c.l.b16 %v586
  %v4287 = vunpack.c.l.b16 %v587
  %v4288 = vunpack.c.l.b16 %v588
  %v4289 = vunpack.c.l.b16 %v589
  %v4290 = vunpack.c.l.b16 %v590
  %v4291 = vunpack.c.l.b16 %v591
  %v4292 = vunpack.c.l.b16 %v592
  %v4293 = vunpack.c.l.b16 %v593
  %v4294 = vunpack.c.l.b16 %v594
  %v4295 = vunpack.c.l.b16 %v595
  %v4296 = vunpack.c.l.b16 %v596
  %v4297 = vunpack.c.l.b16 %v597
  %v4298 = vunpack.c.l.b16 %v598
  %v4299 = vunpack.c.l.b16 %v599
  %v4300 = vunpack.c.l.b16 %v600
  %v4301 = vunpack.c.l.b16 %v601
  %v4302 = vunpack.c.l.b16 %v602
  %v4303 = vunpack.c.l.b16 %v603
  %v4304 = vunpack.c.l.b16 %v604
  %v4305 = vunpack.c.l.b16 %v605
  %v4306 = vunpack.c.l.b16 %v606
  %v4307 = vunpack.c.l.b16 %v607
  %v4308 = vunpack.c.l.b16 %v608
  %v4309 = vunpack.c.l.b16 %v609
  %v4310 = vunpack.c.l.b16 %v610
  %v4311 = vunpack.c.l.b16 %v611
  %v4312 = vunpack.c.l.b16 %v612
  %v4313 = vunpack.c.l.b16 %v613
  %v4314 = vunpack.c.l.b16 %v614
  %v4315 = vunpack.c.l.b16 %v615
  %v4316 = vunpack.c.l.b16 %v616
  %v4317 = vunpack.c.l.b16 %v617
  %v4318 = vunpack.c.l.b16 %v618
  %v4319 = vunpack.c.l.b16 %v619
  %v4320 = vunpack.c.l.b16 %v620
  %v4321 = vunpack.c.l.b16 %v621
  %v4322 = vunpack.c.l.b16 %v622
  %v4323 = vunpack.c.l.b16 %v623
  %v4324 = vunpack.c.l.b16 %v624
  %v4325 = vunpack.c.l.b16 %v625
  %v4326 = vunpack.c.l.b16 %v626
  %v4327 = vunpack.c.l.b16 %v627
  %v4328 = vunpack.c.l.b16 %v628
  %v4329 = vunpack.c.l.b16 %v629
  %v4330 = vunpack.c.l.b16 %v630
  %v4331 = vunpack.c.l.b16 %v631
  %v4332 = vunpack.c.l.b16 %v632
  %v4333 = vunpack.c.l.b16 %v633
  %v4334 = vunpack.c.l.b16 %v634
  %v4335 = vunpack.c.l.b16 %v635
  %v4336 = vunpack.c.l.b16 %v636
  %v4337 = vunpack.c.l.b16 %v637
  %v4338 = vunpack.c.l.b16 %v638
  %v4339 = vunpack.c.l.b16 %v639
  %v4340 = vunpack.c.l.b16 %v640
  %v4341 = vunpack.c.l.b16 %v641
  %v4342 = vunpack.c.l.b16 %v642
  %v4343 = vunpack.c.l.b16 %v643
  %v4344 = vunpack.c.l.b16 %v644
  %v4345 = vunpack.c.l.b16 %v645
  %v4346 = vunpack.c.l.b16 %v646
  %v4347 = vunpack.c.l.b16 %v647
  %v4348 = vunpack.c.l.b16 %v648
  %v4349 = vunpack.c.l.b16 %v649
  %v4350 = vunpack.c.l.b16 %v650
  %v4351 = vunpack.c.l.b16 %v651
  %v4352 = vunpack.c.l.b16 %v652
  %v4353 = vunpack.c.l.b16 %v653
  %v4354 = vunpack.c.l.b16 %v654
  %v4355 = vunpack.c.l.b16 %v655
  %v4356 = vunpack.c.l.b16 %v656
  %v4357 = vunpack.c.l.b16 %v657
  %v4358 = vunpack.c.l.b16 %v658
  %v4359 = vunpack.c.l.b16 %v659
  %v4360 = vunpack.c.l.b16 %v660
  %v4361 = vunpack.c.l.b16 %v661
  %v4362 = vunpack.c.l.b16 %v662
  %v4363 = vunpack.c.l.b16 %v663
  %v4364 = vunpack.c.l.b16 %v664
  %v4365 = vunpack.c.l.b16 %v665
  %v4366 = vunpack.c.l.b16 %v666
  %v4367 = vunpack.c.l.b16 %v667
  %v4368 = vunpack.c.l.b16 %v668
  %v4369 = vunpack.c.l.b16 %v669
  %v4370 = vunpack.c.l.b16 %v670
  %v4371 = vunpack.c.l.b16 %v671
  %v4372 = vunpack.c.l.b16 %v672
  %v4373 = vunpack.c.l.b16 %v673
  %v4374 = vunpack.c.l.b16 %v674
  %v4375 = vunpack.c.l.b16 %v675
  %v4376 = vunpack.c.l.b16 %v676
  %v4377 = vunpack.c.l.b16 %v677
  %v4378 = vunpack.c.l.b16 %v678
  %v4379 = vunpack.c.l.b16 %v679
  %v4380 = vunpack.c.l.b16 %v680
  %v4381 = vunpack.c.l.b16 %v681
  %v4382 = vunpack.c.l.b16 %v682
  %v4383 = vunpack.c.l.b16 %v683
  %v4384 = vunpack.c.l.b16 %v684
  %v4385 = vunpack.c.l.b16 %v685
  %v4386 = vunpack.c.l.b16 %v686
  %v4387 = vunpack.c.l.b16 %v687
  %v4388 = vunpack.c.l.b16 %v688
  %v4389 = vunpack.c.l.b16 %v689
  %v4390 = vunpack.c.l.b16 %v690
  %v4391 = vunpack.c.l.b16 %v691
  %v4392 = vunpack.c.l.b16 %v692
  %v4393 = vunpack.c.l.b16 %v693
  %v4394 = vunpack.c.l.b16 %v694
  %v4395 = vunpack.c.l.b16 %v695
  %v4396 = vunpack.c.l.b16 %v696
  %v4397 = vunpack.c.l.b16 %v697
  %v4398 = vunpack.c.l.b16 %v698
  %v4399 = vunpack.c.l.b16 %v699
  %v4400 = vunpack.c.l.b16 %v700
  %v4401 = vunpack.c.l.b16 %v701
  %v4402 = vunpack.c.l.b16 %v702
  %v4403 = vunpack.c.l.b16 %v703
  %v4404 = vunpack.c.l.b16 %v704
  %v4405 = vunpack.c.l.b16 %v705
  %v4406 = vunpack.c.l.b16 %v706
  %v4407 = vunpack.c.l.b16 %v707
  %v4408 = vunpack.c.l.b16 %v708
  %v4409 = vunpack.c.l.b16 %v709
  %v4410 = vunpack.c.l.b16 %v710
  %v4411 = vunpack.c.l.b16 %v711
  %v4412 = vunpack.c.l.b16 %v712
  %v4413 = vunpack.c.l.b16 %v713
  %v4414 = vunpack.c.l.b16 %v714
  %v4415 = vunpack.c.l.b16 %v715
  %v4416 = vunpack.c.l.b16 %v716
  %v4417 = vunpack.c.l.b16 %v717
  %v4418 = vunpack.c.l.b16 %v718
  %v4419 = vunpack.c.l.b16 %v719
  %v4420 = vunpack.c.l.b16 %v720
  %v4421 = vunpack.c.l.b16 %v721
  %v4422 = vunpack.c.l.b16 %v722
  %v4423 = vunpack.c.l.b16 %v723
  %v4424 = vunpack.c.l.b16 %v724
  %v4425 = vunpack.c.l.b16 %v725
  %v4426 = vunpack.c.l.b16 %v726
  %v4427 = vunpack.c.l.b16 %v727
  %v4428 = vunpack.c.l.b16 %v728
  %v4429 = vunpack.c.l.b16 %v729
  %v4430 = vunpack.c.l.b16 %v730
  %v4431 = vunpack.c.l.b16 %v731
  %v4432 = vunpack.c.l.b16 %v732
  %v4433 = vunpack.c.l.b16 %v733
  %v4434 = vunpack.c.l.b16 %v734
  %v4435 = vunpack.c.l.b16 %v735
  %v4436 = vunpack.c.l.b16 %v736
  %v4437 = vunpack.c.l.b16 %v737
  %v4438 = vunpack.c.l.b16 %v738
  %v4439 = vunpack.c.l.b16 %v739
  %v4440 = vunpack.c.l.b16 %v740
  %v4441 = vunpack.c.l.b16 %v741
  %v4442 = vunpack.c.l.b16 %v742
  %v4443 = vunpack.c.l.b16 %v743
  %v4444 = vunpack.c.l.b16 %v744
  %v4445 = vunpack.c.l.b16 %v745
  %v4446 = vunpack.c.l.b16 %v746
  %v4447 = vunpack.c.l.b16 %v747
  %v4448 = vunpack.c.l.b16 %v748
  %v4449 = vunpack.c.l.b16 %v749
  %v4450 = vunpack.c.l.b16 %v750
  %v4451 = vunpack.c.l.b16 %v751
  %v4452 = vunpack.c.l.b16 %v752
  %v4453 = vunpack.c.l.b16 %v753
  %v4454 = vunpack.c.l.b16 %v754
  %v4455 = vunpack.c.l.b16 %v755
  %v4456 = vunpack.c.l.b16 %v756
  %v4457 = vunpack.c.l.b16 %v757
  %v4458 = vunpack.c.l.b16 %v758
  %v4459 = vunpack.c.l.b16 %v759
  %v4460 = vunpack.c.l.b16 %v760
  %v4461 = vunpack.c.l.b16 %v761
  %v4462 = vunpack.c.l.b16 %v762
  %v4463 = vunpack.c.l.b16 %v763
  %v4464 = vunpack.c.l.b16 %v764
  %v4465 = vunpack.c.l.b16 %v765
  %v4466 = vunpack.c.l.b16 %v766
  %v4467 = vunpack.c.l.b16 %v767
  %v4468 = vunpack.c.l.b16 %v768
  %v4469 = vunpack.c.l.b16 %v769
  %v4470 = vunpack.c.l.b16 %v770
  %v4471 = vunpack.c.l.b16 %v771
  %v4472 = vunpack.c.l.b16 %v772
  %v4473 = vunpack.c.l.b16 %v773
  %v4474 = vunpack.c.l.b16 %v774
  %v4475 = vunpack.c.l.b16 %v775
  %v4476 = vunpack.c.l.b16 %v776
  %v4477 = vunpack.c.l.b16 %v777
  %v4478 = vunpack.c.l.b16 %v778
  %v4479 = vunpack.c.l.b16 %v779
  %v4480 = vunpack.c.l.b16 %v780
  %v4481 = vunpack.c.l.b16 %v781
  %v4482 = vunpack.c.l.b16 %v782
  %v4483 = vunpack.c.l.b16 %v783
  %v4484 = vunpack.c.l.b16 %v784
  %v4485 = vunpack.c.l.b16 %v785
  %v4486 = vunpack.c.l.b16 %v786
  %v4487 = vunpack.c.l.b16 %v787
  %v4488 = vunpack.c.l.b16 %v788
  %v4489 = vunpack.c.l.b16 %v789
  %v4490 = vunpack.c.l.b16 %v790
  %v4491 = vunpack.c.l.b16 %v791
  %v4492 = vunpack.c.l.b16 %v792
  %v4493 = vunpack.c.l.b16 %v793
  %v4494 = vunpack.c.l.b16 %v794
  %v4495 = vunpack.c.l.b16 %v795
  %v4496 = vunpack.c.l.b16 %v796
  %v4497 = vunpack.c.l.b16 %v797
  %v4498 = vunpack.c.l.b16 %v798
  %v4499 = vunpack.c.l.b16 %v799
  %v4500 = vunpack.c.l.b16 %v800
  %v4501 = vunpack.c.l.b16 %v801
  %v4502 = vunpack.c.l.b16 %v802
  %v4503 = vunpack.c.l.b16 %v803
  %v4504 = vunpack.c.l.b16 %v804
  %v4505 = vunpack.c.l.b16 %v805
  %v4506 = vunpack.c.l.b16 %v806
  %v4507 = vunpack.c.l.b16 %v807
  %v4508 = vunpack.c.l.b16 %v808
  %v4509 = vunpack.c.l.b16 %v809
  %v4510 = vunpack.c.l.b16 %v810
  %v4511 = vunpack.c.l.b16 %v811
  %v4512 = vunpack.c.l.b16 %v812
  %v4513 = vunpack.c.l.b16 %v813
  %v4514 = vunpack.c.l.b16 %v814
  %v4515 = vunpack.c.l.b16 %v815
  %v4516 = vunpack.c.l.b16 %v816
  %v4517 = vunpack.c.l.b16 %v817
  %v4518 = vunpack.c.l.b16 %v818
  %v4519 = vunpack.c.l.b16 %v819
  %v4520 = vunpack.c.l.b16 %v820
  %v4521 = vunpack.c.l.b16 %v821
  %v4522 = vunpack.c.l.b16 %v822
  %v4523 = vunpack.c.l.b16 %v823
  %v4524 = vunpack.c.l.b16 %v824
  %v4525 = vunpack.c.l.b16 %v825
  %v4526 = vunpack.c.l.b16 %v826
  %v4527 = vunpack.c.l.b16 %v827
  %v4528 = vunpack.c.l.b16 %v828
  %v4529 = vunpack.c.l.b16 %v829
  %v4530 = vunpack.c.l.b16 %v830
  %v4531 = vunpack.c.l.b16 %v831
  %v4532 = vunpack.c.l.b16 %v832
  %v4533 = vunpack.c.l.b16 %v833
  %v4534 = vunpack.c.l.b16 %v834
  %v4535 = vunpack.c.l.b16 %v835
  %v4536 = vunpack.c.l.b16 %v836
  %v4537 = vunpack.c.l.b16 %v837
  %v4538 = vunpack.c.l.b16 %v838
  %v4539 = vunpack.c.l.b16 %v839
  %v4540 = vunpack.c.l.b16 %v840
  %v4541 = vunpack.c.l.b16 %v841
  %v4542 = vunpack.c.l.b16 %v842
  %v4543 = vunpack.c.l.b16 %v843
  %v4544 = vunpack.c.l.b16 %v844
  %v4545 = vunpack.c.l.b16 %v845
  %v4546 = vunpack.c.l.b16 %v846
  %v4547 = vunpack.c.l.b16 %v847
  %v4548 = vunpack.c.l.b16 %v848
  %v4549 = vunpack.c.l.b16 %v849
  %v4550 = vunpack.c.l.b16 %v850
  %v4551 = vunpack.c.l.b16 %v851
  %v4552 = vunpack.c.l.b16 %v852
  %v4553 = vunpack.c.l.b16 %v853
  %v4554 = vunpack.c.l.b16 %v854
  %v4555 = vunpack.c.l.b16 %v855
  %v4556 = vunpack.c.l.b16 %v856
  %v4557 = vunpack.c.l.b16 %v857
  %v4558 = vunpack.c.l.b16 %v858
  %v4559 = vunpack.c.l.b16 %v859
  %v4560 = vunpack.c.l.b16 %v860
  %v4561 = vunpack.c.l.b16 %v861
  %v4562 = vunpack.c.l.b16 %v862
  %v4563 = vunpack.c.l.b16 %v863
  %v4564 = vunpack.c.l.b16 %v864
  %v4565 = vunpack.c.l.b16 %v865
  %v4566 = vunpack.c.l.b16 %v866
  %v4567 = vunpack.c.l.b16 %v867
  %v4568 = vunpack.c.l.b16 %v868
  %v4569 = vunpack.c.l.b16 %v869
  %v4570 = vunpack.c.l.b16 %v870
  %v4571 = vunpack.c.l.b16 %v871
  %v4572 = vunpack.c.l.b16 %v872
  %v4573 = vunpack.c.l.b16 %v873
  %v4574 = vunpack.c.l.b16 %v874
  %v4575 = vunpack.c.l.b16 %v875
  %v4576 = vunpack.c.l.b16 %v876
  %v4577 = vunpack.c.l.b16 %v877
  %v4578 = vunpack.c.l.b16 %v878
  %v4579 = vunpack.c.l.b16 %v879
  %v4580 = vunpack.c.l.b16 %v880
  %v4581 = vunpack.c.l.b16 %v881
  %v4582 = vunpack.c.l.b16 %v882
  %v4583 = vunpack.c.l.b16 %v883
  %v4584 = vunpack.c.l.b16 %v884
  %v4585 = vunpack.c.l.b16 %v885
  %v4586 = vunpack.c.l.b16 %v886
  %v4587 = vunpack.c.l.b16 %v887
  %v4588 = vunpack.c.l.b16 %v888
  %v4589 = vunpack.c.l.b16 %v889
  %v4590 = vunpack.c.l.b16 %v890
  %v4591 = vunpack.c.l.b16 %v891
  %v4592 = vunpack.c.l.b16 %v892
  %v4593 = vunpack.c.l.b16 %v893
  %v4594 = vunpack.c.l.b16 %v894
  %v4595 = vunpack.c.l.b16 %v895
  %v4596 = vunpack.c.l.b16 %v896
  %v4597 = vunpack.c.l.b16 %v897
  %v4598 = vunpack.c.l.b16 %v898
  %v4599 = vunpack.c.l.b16 %v899
  %v4600 = vunpack.c.l.b16 %v900
  %v4601 = vunpack.c.l.b16 %v901
  %v4602 = vunpack.c.l.b16 %v902
  %v4603 = vunpack.c.l.b16 %v903
  %v4604 = vunpack.c.l.b16 %v904
  %v4605 = vunpack.c.l.b16 %v905
  %v4606 = vunpack.c.l.b16 %v906
  %v4607 = vunpack.c.l.b16 %v907
  %v4608 = vunpack.c.l.b16 %v908
  %v4609 = vunpack.c.l.b16 %v909
  %v4610 = vunpack.c.l.b16 %v910
  %v4611 = vunpack.c.l.b16 %v911
  %v4612 = vunpack.c.l.b16 %v912
  %v4613 = vunpack.c.l.b16 %v913
  %v4614 = vunpack.c.l.b16 %v914
  %v4615 = vunpack.c.l.b16 %v915
  %v4616 = vunpack.c.l.b16 %v916
  %v4617 = vunpack.c.l.b16 %v917
  %v4618 = vunpack.c.l.b16 %v918
  %v4619 = vunpack.c.l.b16 %v919
  %v4620 = vunpack.c.l.b16 %v920
  %v4621 = vunpack.c.l.b16 %v921
  %v4622 = vunpack.c.l.b16 %v922
  %v4623 = vunpack.c.l.b16 %v923
  %v4624 = vunpack.c.l.b16 %v924
  %v4625 = vunpack.c.l.b16 %v925
  %v4626 = vunpack.c.l.b16 %v926
  %v4627 = vunpack.c.l.b16 %v927
  %v4628 = vunpack.c.l.b16 %v928
  %v4629 = vunpack.c.l.b16 %v929
  %v4630 = vunpack.c.l.b16 %v930
  %v4631 = vunpack.c.l.b16 %v931
  %v4632 = vunpack.c.l.b16 %v932
  %v4633 = vunpack.c.l.b16 %v933
  %v4634 = vunpack.c.l.b16 %v934
  %v4635 = vunpack.c.l.b16 %v935
  %v4636 = vunpack.c.l.b16 %v936
  %v4637 = vunpack.c.l.b16 %v937
  %v4638 = vunpack.c.l.b16 %v938
  %v4639 = vunpack.c.l.b16 %v939
  %v4640 = vunpack.c.l.b16 %v940
  %v4641 = vunpack.c.l.b16 %v941
  %v4642 = vunpack.c.l.b16 %v942
  %v4643 = vunpack.c.l.b16 %v943
  %v4644 = vunpack.c.l.b16 %v944
  %v4645 = vunpack.c.l.b16 %v945
  %v4646 = vunpack.c.l.b16 %v946
  %v4647 = vunpack.c.l.b16 %v947
  %v4648 = vunpack.c.l.b16 %v948
  %v4649 = vunpack.c.l.b16 %v949
  %v4650 = vunpack.c.l.b16 %v950
  %v4651 = vunpack.c.l.b16 %v951
  %v4652 = vunpack.c.l.b16 %v952
  %v4653 = vunpack.c.l.b16 %v953
  %v4654 = vunpack.c.l.b16 %v954
  %v4655 = vunpack.c.l.b16 %v955
  %v4656 = vunpack.c.l.b16 %v956
  %v4657 = vunpack.c.l.b16 %v957
  %v4658 = vunpack.c.l.b16 %v958
  %v4659 = vunpack.c.l.b16 %v959
  %v4660 = vunpack.c.l.b16 %v960
  %v4661 = vunpack.c.l.b16 %v961
  %v4662 = vunpack.c.l.b16 %v962
  %v4663 = vunpack.c.l.b16 %v963
  %v4664 = vunpack.c.l.b16 %v964
  %v4665 = vunpack.c.l.b16 %v965
  %v4666 = vunpack.c.l.b16 %v966
  %v4667 = vunpack.c.l.b16 %v967
  %v4668 = vunpack.c.l.b16 %v968
  %v4669 = vunpack.c.l.b16 %v969
  %v4670 = vunpack.c.l.b16 %v970
  %v4671 = vunpack.c.l.b16 %v971
  %v4672 = vunpack.c.l.b16 %v972
  %v4673 = vunpack.c.l.b16 %v973
  %v4674 = vunpack.c.l.b16 %v974
  %v4675 = vunpack.c.l.b16 %v975
  %v4676 = vunpack.c.l.b16 %v976
  %v4677 = vunpack.c.l.b16 %v977
  %v4678 = vunpack.c.l.b16 %v978
  %v4679 = vunpack.c.l.b16 %v979
  %v4680 = vunpack.c.l.b16 %v980
  %v4681 = vunpack.c.l.b16 %v981
  %v4682 = vunpack.c.l.b16 %v982
  %v4683 = vunpack.c.l.b16 %v983
  %v4684 = vunpack.c.l.b16 %v984
  %v4685 = vunpack.c.l.b16 %v985
  %v4686 = vunpack.c.l.b16 %v986
  %v4687 = vunpack.c.l.b16 %v987
  %v4688 = vunpack.c.l.b16 %v988
  %v4689 = vunpack.c.l.b16 %v989
  %v4690 = vunpack.c.l.b16 %v990
  %v4691 = vunpack.c.l.b16 %v991
  %v4692 = vunpack.c.l.b16 %v992
  %v4693 = vunpack.c.l.b16 %v993
  %v4694 = vunpack.c.l.b16 %v994
  %v4695 = vunpack.c.l.b16 %v995
  %v4696 = vunpack.c.l.b16 %v996
  %v4697 = vunpack.c.l.b16 %v997
  %v4698 = vunpack.c.l.b16 %v998
  %v4699 = vunpack.c.l.b16 %v999
  %v4700 = vunpack.c.l.b16 %v1000
  %v4701 = vunpack.c.l.b16 %v1001
  %v4702 = vunpack.c.l.b16 %v1002
  %v4703 = vunpack.c.l.b16 %v1003
  %v4704 = vunpack.c.l.b16 %v1004
  %v4705 = vunpack.c.l.b16 %v1005
  %v4706 = vunpack.c.l.b16 %v1006
  %v4707 = vunpack.c.l.b16 %v1007
  %v4708 = vunpack.c.l.b16 %v1008
  %v4709 = vunpack.c.l.b16 %v1009
  %v4710 = vunpack.c.l.b16 %v1010
  %v4711 = vunpack.c.l.b16 %v1011
  %v4712 = vunpack.c.l.b16 %v1012
  %v4713 = vunpack.c.l.b16 %v1013
  %v4714 = vunpack.c.l.b16 %v1014
  %v4715 = vunpack.c.l.b16 %v1015
  %v4716 = vunpack.c.l.b16 %v1016
  %v4717 = vunpack.c.l.b16 %v1017
  %v4718 = vunpack.c.l.b16 %v1018
  %v4719 = vunpack.c.l.b16 %v1019
  %v4720 = vunpack.c.l.b16 %v1020
  %v4721 = vunpack.c.l.b16 %v1021
  %v4722 = vunpack.c.l.b16 %v1022
  %v4723 = vunpack.c.l.b16 %v1023
  %v4724 = vunpack.c.l.b16 %v1024
  %v4725 = vunpack.c.l.b16 %v1025
  %v4726 = vunpack.c.l.b16 %v1026
  %v4727 = vunpack.c.l.b16 %v1027
  %v4728 = vunpack.c.l.b16 %v1028
  %v4729 = vunpack.c.l.b16 %v1029
  %v4730 = vunpack.c.l.b16 %v1030
  %v4731 = vunpack.c.l.b16 %v1031
  %v4732 = vunpack.c.l.b16 %v1032
  %v4733 = vunpack.c.l.b16 %v1033
  %v4734 = vunpack.c.l.b16 %v1034
  %v4735 = vunpack.c.l.b16 %v1035
  %v4736 = vunpack.c.l.b16 %v1036
  %v4737 = vunpack.c.l.b16 %v1037
  %v4738 = vunpack.c.l.b16 %v1038
  %v4739 = vunpack.c.l.b16 %v1039
  %v4740 = vunpack.c.l.b16 %v1040
  %v4741 = vunpack.c.l.b16 %v1041
  %v4742 = vunpack.c.l.b16 %v1042
  %v4743 = vunpack.c.l.b16 %v1043
  %v4744 = vunpack.c.l.b16 %v1044
  %v4745 = vunpack.c.l.b16 %v1045
  %v4746 = vunpack.c.l.b16 %v1046
  %v4747 = vunpack.c.l.b16 %v1047
  %v4748 = vunpack.c.l.b16 %v1048
  %v4749 = vunpack.c.l.b16 %v1049
  %v4750 = vunpack.c.l.b16 %v1050
  %v4751 = vunpack.c.l.b16 %v1051
  %v4752 = vunpack.c.l.b16 %v1052
  %v4753 = vunpack.c.l.b16 %v1053
  %v4754 = vunpack.c.l.b16 %v1054
  %v4755 = vunpack.c.l.b16 %v1055
  %v4756 = vunpack.c.l.b16 %v1056
  %v4757 = vunpack.c.l.b16 %v1057
  %v4758 = vunpack.c.l.b16 %v1058
  %v4759 = vunpack.c.l.b16 %v1059
  %v4760 = vunpack.c.l.b16 %v1060
  %v4761 = vunpack.c.l.b16 %v1061
  %v4762 = vunpack.c.l.b16 %v1062
  %v4763 = vunpack.c.l.b16 %v1063
  %v4764 = vunpack.c.l.b16 %v1064
  %v4765 = vunpack.c.l.b16 %v1065
  %v4766 = vunpack.c.l.b16 %v1066
  %v4767 = vunpack.c.l.b16 %v1067
  %v4768 = vunpack.c.l.b16 %v1068
  %v4769 = vunpack.c.l.b16 %v1069
  %v4770 = vunpack.c.l.b16 %v1070
  %v4771 = vunpack.c.l.b16 %v1071
  %v4772 = vunpack.c.l.b16 %v1072
  %v4773 = vunpack.c.l.b16 %v1073
  %v4774 = vunpack.c.l.b16 %v1074
  %v4775 = vunpack.c.l.b16 %v1075
  %v4776 = vunpack.c.l.b16 %v1076
  %v4777 = vunpack.c.l.b16 %v1077
  %v4778 = vunpack.c.l.b16 %v1078
  %v4779 = vunpack.c.l.b16 %v1079
  %v4780 = vunpack.c.l.b16 %v1080
  %v4781 = vunpack.c.l.b16 %v1081
  %v4782 = vunpack.c.l.b16 %v1082
  %v4783 = vunpack.c.l.b16 %v1083
  %v4784 = vunpack.c.l.b16 %v1084
  %v4785 = vunpack.c.l.b16 %v1085
  %v4786 = vunpack.c.l.b16 %v1086
  %v4787 = vunpack.c.l.b16 %v1087
  %v4788 = vunpack.c.l.b16 %v1088
  %v4789 = vunpack.c.l.b16 %v1089
  %v4790 = vunpack.c.l.b16 %v1090
  %v4791 = vunpack.c.l.b16 %v1091
  %v4792 = vunpack.c.l.b16 %v1092
  %v4793 = vunpack.c.l.b16 %v1093
  %v4794 = vunpack.c.l.b16 %v1094
  %v4795 = vunpack.c.l.b16 %v1095
  %v4796 = vunpack.c.l.b16 %v1096
  %v4797 = vunpack.c.l.b16 %v1097
  %v4798 = vunpack.c.l.b16 %v1098
  %v4799 = vunpack.c.l.b16 %v1099
  %v4800 = vunpack.c.l.b16 %v1100
  %v4801 = vunpack.c.l.b16 %v1101
  %v4802 = vunpack.c.l.b16 %v1102
  %v4803 = vunpack.c.l.b16 %v1103
  %v4804 = vunpack.c.l.b16 %v1104
  %v4805 = vunpack.c.l.b16 %v1105
  %v4806 = vunpack.c.l.b16 %v1106
  %v4807 = vunpack.c.l.b16 %v1107
  %v4808 = vunpack.c.l.b16 %v1108
  %v4809 = vunpack.c.l.b16 %v1109
  %v4810 = vunpack.c.l.b16 %v1110
  %v4811 = vunpack.c.l.b16 %v1111
  %v4812 = vunpack.c.l.b16 %v1112
  %v4813 = vunpack.c.l.b16 %v1113
  %v4814 = vunpack.c.l.b16 %v1114
  %v4815 = vunpack.c.l.b16 %v1115
  %v4816 = vunpack.c.l.b16 %v1116
  %v4817 = vunpack.c.l.b16 %v1117
  %v4818 = vunpack.c.l.b16 %v1118
  %v4819 = vunpack.c.l.b16 %v1119
  %v4820 = vunpack.c.l.b16 %v1120
  %v4821 = vunpack.c.l.b16 %v1121
  %v4822 = vunpack.c.l.b16 %v1122
  %v4823 = vunpack.c.l.b16 %v1123
  %v4824 = vunpack.c.l.b16 %v1124
  %v4825 = vunpack.c.l.b16 %v1125
  %v4826 = vunpack.c.l.b16 %v1126
  %v4827 = vunpack.c.l.b16 %v1127
  %v4828 = vunpack.c.l.b16 %v1128
  %v4829 = vunpack.c.l.b16 %v1129
  %v4830 = vunpack.c.l.b16 %v1130
  %v4831 = vunpack.c.l.b16 %v1131
  %v4832 = vunpack.c.l.b16 %v1132
  %v4833 = vunpack.c.l.b16 %v1133
  %v4834 = vunpack.c.l.b16 %v1134
  %v4835 = vunpack.c.l.b16 %v1135
  %v4836 = vunpack.c.l.b16 %v1136
  %v4837 = vunpack.c.l.b16 %v1137
  %v4838 = vunpack.c.l.b16 %v1138
  %v4839 = vunpack.c.l.b16 %v1139
  %v4840 = vunpack.c.l.b16 %v1140
  %v4841 = vunpack.c.l.b16 %v1141
  %v4842 = vunpack.c.l.b16 %v1142
  %v4843 = vunpack.c.l.b16 %v1143
  %v4844 = vunpack.c.l.b16 %v1144
  %v4845 = vunpack.c.l.b16 %v1145
  %v4846 = vunpack.c.l.b16 %v1146
  %v4847 = vunpack.c.l.b16 %v1147
  %v4848 = vunpack.c.l.b16 %v1148
  %v4849 = vunpack.c.l.b16 %v1149
  %v4850 = vunpack.c.l.b16 %v1150
  %v4851 = vunpack.c.l.b16 %v1151
  %v4852 = vunpack.c.l.b16 %v1152
  %v4853 = vunpack.c.l.b16 %v1153
  %v4854 = vunpack.c.l.b16 %v1154
  %v4855 = vunpack.c.l.b16 %v1155
  %v4856 = vunpack.c.l.b16 %v1156
  %v4857 = vunpack.c.l.b16 %v1157
  %v4858 = vunpack.c.l.b16 %v1158
  %v4859 = vunpack.c.l.b16 %v1159
  %v4860 = vunpack.c.l.b16 %v1160
  %v4861 = vunpack.c.l.b16 %v1161
  %v4862 = vunpack.c.l.b16 %v1162
  %v4863 = vunpack.c.l.b16 %v1163
  %v4864 = vunpack.c.l.b16 %v1164
  %v4865 = vunpack.c.l.b16 %v1165
  %v4866 = vunpack.c.l.b16 %v1166
  %v4867 = vunpack.c.l.b16 %v1167
  %v4868 = vunpack.c.l.b16 %v1168
  %v4869 = vunpack.c.l.b16 %v1169
  %v4870 = vunpack.c.l.b16 %v1170
  %v4871 = vunpack.c.l.b16 %v1171
  %v4872 = vunpack.c.l.b16 %v1172
  %v4873 = vunpack.c.l.b16 %v1173
  %v4874 = vunpack.c.l.b16 %v1174
  %v4875 = vunpack.c.l.b16 %v1175
  %v4876 = vunpack.c.l.b16 %v1176
  %v4877 = vunpack.c.l.b16 %v1177
  %v4878 = vunpack.c.l.b16 %v1178
  %v4879 = vunpack.c.l.b16 %v1179
  %v4880 = vunpack.c.l.b16 %v1180
  %v4881 = vunpack.c.l.b16 %v1181
  %v4882 = vunpack.c.l.b16 %v1182
  %v4883 = vunpack.c.l.b16 %v1183
  %v4884 = vunpack.c.l.b16 %v1184
  %v4885 = vunpack.c.l.b16 %v1185
  %v4886 = vunpack.c.l.b16 %v1186
  %v4887 = vunpack.c.l.b16 %v1187
  %v4888 = vunpack.c.l.b16 %v1188
  %v4889 = vunpack.c.l.b16 %v1189
  %v4890 = vunpack.c.l.b16 %v1190
  %v4891 = vunpack.c.l.b16 %v1191
  %v4892 = vunpack.c.l.b16 %v1192
  %v4893 = vunpack.c.l.b16 %v1193
  %v4894 = vunpack.c.l.b16 %v1194
  %v4895 = vunpack.c.l.b16 %v1195
  %v4896 = vunpack.c.l.b16 %v1196
  %v4897 = vunpack.c.l.b16 %v1197
  %v4898 = vunpack.c.l.b16 %v1198
  %v4899 = vunpack.c.l.b16 %v1199
  %v4900 = vunpack.c.l.b16 %v1200
  %v4901 = vunpack.c.l.b16 %v1201
  %v4902 = vunpack.c.l.b16 %v1202
  %v4903 = vunpack.c.l.b16 %v1203
  %v4904 = vunpack.c.l.b16 %v1204
  %v4905 = vunpack.c.l.b16 %v1205
  %v4906 = vunpack.c.l.b16 %v1206
  %v4907 = vunpack.c.l.b16 %v1207
  %v4908 = vunpack.c.l.b16 %v1208
  %v4909 = vunpack.c.l.b16 %v1209
  %v4910 = vunpack.c.l.b16 %v1210
  %v4911 = vunpack.c.l.b16 %v1211
  %v4912 = vunpack.c.l.b16 %v1212
  %v4913 = vunpack.c.l.b16 %v1213
  %v4914 = vunpack.c.l.b16 %v1214
  %v4915 = vunpack.c.l.b16 %v1215
  %v4916 = vunpack.c.l.b16 %v1216
  %v4917 = vunpack.c.l.b16 %v1217
  %v4918 = vunpack.c.l.b16 %v1218
  %v4919 = vunpack.c.l.b16 %v1219
  %v4920 = vunpack.c.l.b16 %v1220
  %v4921 = vunpack.c.l.b16 %v1221
  %v4922 = vunpack.c.l.b16 %v1222
  %v4923 = vunpack.c.l.b16 %v1223
  %v4924 = vunpack.c.l.b16 %v1224
  %v4925 = vunpack.c.l.b16 %v1225
  %v4926 = vunpack.c.l.b16 %v1226
  %v4927 = vunpack.c.l.b16 %v1227
  %v4928 = vunpack.c.l.b16 %v1228
  %v4929 = vunpack.c.l.b16 %v1229
  %v4930 = vunpack.c.l.b16 %v1230
  %v4931 = vunpack.c.l.b16 %v1231
  %v4932 = vunpack.c.l.b16 %v1232
  %v4933 = vunpack.c.l.b16 %v1233
  %v4934 = vunpack.c.l.b16 %v1234
  %v4935 = vunpack.c.l.b16 %v1235
  %v4936 = vunpack.c.l.b16 %v1236
  %v4937 = vunpack.c.l.b16 %v1237
  %v4938 = vunpack.c.l.b16 %v1238
  %v4939 = vunpack.c.l.b16 %v1239
  %v4940 = vunpack.c.l.b16 %v1240
  %v4941 = vunpack.c.l.b16 %v1241
  %v4942 = vunpack.c.l.b16 %v1242
  %v4943 = vunpack.c.l.b16 %v1243
  %v4944 = vunpack.c.l.b16 %v1244
  %v4945 = vunpack.c.l.b16 %v1245
  %v4946 = vunpack.c.l.b16 %v1246
  %v4947 = vunpack.c.l.b16 %v1247
  %v4948 = vunpack.c.l.b16 %v1248
  %v4949 = vunpack.c.l.b16 %v1249
  %v4950 = vunpack.c.l.b16 %v1250
  %v4951 = vunpack.c.l.b16 %v1251
  %v4952 = vunpack.c.l.b16 %v1252
  %v4953 = vunpack.c.l.b16 %v1253
  %v4954 = vunpack.c.l.b16 %v1254
  %v4955 = vunpack.c.l.b16 %v1255
  %v4956 = vunpack.c.l.b16 %v1256
  %v4957 = vunpack.c.l.b16 %v1257
  %v4958 = vunpack.c.l.b16 %v1258
  %v4959 = vunpack.c.l.b16 %v1259
  %v4960 = vunpack.c.l.b16 %v1260
  %v4961 = vunpack.c.l.b16 %v1261
  %v4962 = vunpack.c.l.b16 %v1262
  %v4963 = vunpack.c.l.b16 %v1263
  %v4964 = vunpack.c.l.b16 %v1264
  %v4965 = vunpack.c.l.b16 %v1265
  %v4966 = vunpack.c.l.b16 %v1266
  %v4967 = vunpack.c.l.b16 %v1267
  %v4968 = vunpack.c.l.b16 %v1268
  %v4969 = vunpack.c.l.b16 %v1269
  %v4970 = vunpack.c.l.b16 %v1270
  %v4971 = vunpack.c.l.b16 %v1271
  %v4972 = vunpack.c.l.b16 %v1272
  %v4973 = vunpack.c.l.b16 %v1273
  %v4974 = vunpack.c.l.b16 %v1274
  %v4975 = vunpack.c.l.b16 %v1275
  %v4976 = vunpack.c.l.b16 %v1276
  %v4977 = vunpack.c.l.b16 %v1277
  %v4978 = vunpack.c.l.b16 %v1278
  %v4979 = vunpack.c.l.b16 %v1279
  %v4980 = vunpack.c.l.b16 %v1280
  %v4981 = vunpack.c.l.b16 %v1281
  %v4982 = vunpack.c.l.b16 %v1282
  %v4983 = vunpack.c.l.b16 %v1283
  %v4984 = vunpack.c.l.b16 %v1284
  %v4985 = vunpack.c.l.b16 %v1285
  %v4986 = vunpack.c.l.b16 %v1286
  %v4987 = vunpack.c.l.b16 %v1287
  %v4988 = vunpack.c.l.b16 %v1288
  %v4989 = vunpack.c.l.b16 %v1289
  %v4990 = vunpack.c.l.b16 %v1290
  %v4991 = vunpack.c.l.b16 %v1291
  %v4992 = vunpack.c.l.b16 %v1292
  %v4993 = vunpack.c.l.b16 %v1293
  %v4994 = vunpack.c.l.b16 %v1294
  %v4995 = vunpack.c.l.b16 %v1295
  %v4996 = vunpack.c.l.b16 %v1296
  %v4997 = vunpack.c.l.b16 %v1297
  %v4998 = vunpack.c.l.b16 %v1298
  %v4999 = vunpack.c.l.b16 %v1299
  %v5000 = vunpack.c.l.b16 %v1300
  %v5001 = vunpack.c.l.b16 %v1301
  %v5002 = vunpack.c.l.b16 %v1302
  %v5003 = vunpack.c.l.b16 %v1303
  %v5004 = vunpack.c.l.b16 %v1304
  %v5005 = vunpack.c.l.b16 %v1305
  %v5006 = vunpack.c.l.b16 %v1306
  %v5007 = vunpack.c.l.b16 %v1307
  %v5008 = vunpack.c.l.b16 %v1308
  %v5009 = vunpack.c.l.b16 %v1309
  %v5010 = vunpack.c.l.b16 %v1310
  %v5011 = vunpack.c.l.b16 %v1311
  %v5012 = vunpack.c.l.b16 %v1312
  %v5013 = vunpack.c.l.b16 %v1313
  %v5014 = vunpack.c.l.b16 %v1314
  %v5015 = vunpack.c.l.b16 %v1315
  %v5016 = vunpack.c.l.b16 %v1316
  %v5017 = vunpack.c.l.b16 %v1317
  %v5018 = vunpack.c.l.b16 %v1318
  %v5019 = vunpack.c.l.b16 %v1319
  %v5020 = vunpack.c.l.b16 %v1320
  %v5021 = vunpack.c.l.b16 %v1321
  %v5022 = vunpack.c.l.b16 %v1322
  %v5023 = vunpack.c.l.b16 %v1323
  %v5024 = vunpack.c.l.b16 %v1324
  %v5025 = vunpack.c.l.b16 %v1325
  %v5026 = vunpack.c.l.b16 %v1326
  %v5027 = vunpack.c.l.b16 %v1327
  %v5028 = vunpack.c.l.b16 %v1328
  %v5029 = vunpack.c.l.b16 %v1329
  %v5030 = vunpack.c.l.b16 %v1330
  %v5031 = vunpack.c.l.b16 %v1331
  %v5032 = vunpack.c.l.b16 %v1332
  %v5033 = vunpack.c.l.b16 %v1333
  %v5034 = vunpack.c.l.b16 %v1334
  %v5035 = vunpack.c.l.b16 %v1335
  %v5036 = vunpack.c.l.b16 %v1336
  %v5037 = vunpack.c.l.b16 %v1337
  %v5038 = vunpack.c.l.b16 %v1338
  %v5039 = vunpack.c.l.b16 %v1339
  %v5040 = vunpack.c.l.b16 %v1340
  %v5041 = vunpack.c.l.b16 %v1341
  %v5042 = vunpack.c.l.b16 %v1342
  %v5043 = vunpack.c.l.b16 %v1343
  %v5044 = vunpack.c.l.b16 %v1344
  %v5045 = vunpack.c.l.b16 %v1345
  %v5046 = vunpack.c.l.b16 %v1346
  %v5047 = vunpack.c.l.b16 %v1347
  %v5048 = vunpack.c.l.b16 %v1348
  %v5049 = vunpack.c.l.b16 %v1349
  %v5050 = vunpack.c.l.b16 %v1350
  %v5051 = vunpack.c.l.b16 %v1351
  %v5052 = vunpack.c.l.b16 %v1352
  %v5053 = vunpack.c.l.b16 %v1353
  %v5054 = vunpack.c.l.b16 %v1354
  %v5055 = vunpack.c.l.b16 %v1355
  %v5056 = vunpack.c.l.b16 %v1356
  %v5057 = vunpack.c.l.b16 %v1357
  %v5058 = vunpack.c.l.b16 %v1358
  %v5059 = vunpack.c.l.b16 %v1359
  %v5060 = vunpack.c.l.b16 %v1360
  %v5061 = vunpack.c.l.b16 %v1361
  %v5062 = vunpack.c.l.b16 %v1362
  %v5063 = vunpack.c.l.b16 %v1363
  %v5064 = vunpack.c.l.b16 %v1364
  %v5065 = vunpack.c.l.b16 %v1365
  %v5066 = vunpack.c.l.b16 %v1366
  %v5067 = vunpack.c.l.b16 %v1367
  %v5068 = vunpack.c.l.b16 %v1368
  %v5069 = vunpack.c.l.b16 %v1369
  %v5070 = vunpack.c.l.b16 %v1370
  %v5071 = vunpack.c.l.b16 %v1371
  %v5072 = vunpack.c.l.b16 %v1372
  %v5073 = vunpack.c.l.b16 %v1373
  %v5074 = vunpack.c.l.b16 %v1374
  %v5075 = vunpack.c.l.b16 %v1375
  %v5076 = vunpack.c.l.b16 %v1376
  %v5077 = vunpack.c.l.b16 %v1377
  %v5078 = vunpack.c.l.b16 %v1378
  %v5079 = vunpack.c.l.b16 %v1379
  %v5080 = vunpack.c.l.b16 %v1380
  %v5081 = vunpack.c.l.b16 %v1381
  %v5082 = vunpack.c.l.b16 %v1382
  %v5083 = vunpack.c.l.b16 %v1383
  %v5084 = vunpack.c.l.b16 %v1384
  %v5085 = vunpack.c.l.b16 %v1385
  %v5086 = vunpack.c.l.b16 %v1386
  %v5087 = vunpack.c.l.b16 %v1387
  %v5088 = vunpack.c.l.b16 %v1388
  %v5089 = vunpack.c.l.b16 %v1389
  %v5090 = vunpack.c.l.b16 %v1390
  %v5091 = vunpack.c.l.b16 %v1391
  %v5092 = vunpack.c.l.b16 %v1392
  %v5093 = vunpack.c.l.b16 %v1393
  %v5094 = vunpack.c.l.b16 %v1394
  %v5095 = vunpack.c.l.b16 %v1395
  %v5096 = vunpack.c.l.b16 %v1396
  %v5097 = vunpack.c.l.b16 %v1397
  %v5098 = vunpack.c.l.b16 %v1398
  %v5099 = vunpack.c.l.b16 %v1399
  %v5100 = vunpack.c.l.b16 %v1400
  %v5101 = vunpack.c.l.b16 %v1401
  %v5102 = vunpack.c.l.b16 %v1402
  %v5103 = vunpack.c.l.b16 %v1403
  %v5104 = vunpack.c.l.b16 %v1404
  %v5105 = vunpack.c.l.b16 %v1405
  %v5106 = vunpack.c.l.b16 %v1406
  %v5107 = vunpack.c.l.b16 %v1407
  %v5108 = vunpack.c.l.b16 %v1408
  %v5109 = vunpack.c.l.b16 %v1409
  %v5110 = vunpack.c.l.b16 %v1410
  %v5111 = vunpack.c.l.b16 %v1411
  %v5112 = vunpack.c.l.b16 %v1412
  %v5113 = vunpack.c.l.b16 %v1413
  %v5114 = vunpack.c.l.b16 %v1414
  %v5115 = vunpack.c.l.b16 %v1415
  %v5116 = vunpack.c.l.b16 %v1416
  %v5117 = vunpack.c.l.b16 %v1417
  %v5118 = vunpack.c.l.b16 %v1418
  %v5119 = vunpack.c.l.b16 %v1419
  %v5120 = vunpack.c.l.b16 %v1420
  %v5121 = vunpack.c.l.b16 %v1421
  %v5122 = vunpack.c.l.b16 %v1422
  %v5123 = vunpack.c.l.b16 %v1423
  %v5124 = vunpack.c.l.b16 %v1424
  %v5125 = vunpack.c.l.b16 %v1425
  %v5126 = vunpack.c.l.b16 %v1426
  %v5127 = vunpack.c.l.b16 %v1427
  %v5128 = vunpack.c.l.b16 %v1428
  %v5129 = vunpack.c.l.b16 %v1429
  %v5130 = vunpack.c.l.b16 %v1430
  %v5131 = vunpack.c.l.b16 %v1431
  %v5132 = vunpack.c.l.b16 %v1432
  %v5133 = vunpack.c.l.b16 %v1433
  %v5134 = vunpack.c.l.b16 %v1434
  %v5135 = vunpack.c.l.b16 %v1435
  %v5136 = vunpack.c.l.b16 %v1436
  %v5137 = vunpack.c.l.b16 %v1437
  %v5138 = vunpack.c.l.b16 %v1438
  %v5139 = vunpack.c.l.b16 %v1439
  %v5140 = vunpack.c.l.b16 %v1440
  %v5141 = vunpack.c.l.b16 %v1441
  %v5142 = vunpack.c.l.b16 %v1442
  %v5143 = vunpack.c.l.b16 %v1443
  %v5144 = vunpack.c.l.b16 %v1444
  %v5145 = vunpack.c.l.b16 %v1445
  %v5146 = vunpack.c.l.b16 %v1446
  %v5147 = vunpack.c.l.b16 %v1447
  %v5148 = vunpack.c.l.b16 %v1448
  %v5149 = vunpack.c.l.b16 %v1449
  %v5150 = vunpack.c.l.b16 %v1450
  %v5151 = vunpack.c.l.b16 %v1451
  %v5152 = vunpack.c.l.b16 %v1452
  %v5153 = vunpack.c.l.b16 %v1453
  %v5154 = vunpack.c.l.b16 %v1454
  %v5155 = vunpack.c.l.b16 %v1455
  %v5156 = vunpack.c.l.b16 %v1456
  %v5157 = vunpack.c.l.b16 %v1457
  %v5158 = vunpack.c.l.b16 %v1458
  %v5159 = vunpack.c.l.b16 %v1459
  %v5160 = vunpack.c.l.b16 %v1460
  %v5161 = vunpack.c.l.b16 %v1461
  %v5162 = vunpack.c.l.b16 %v1462
  %v5163 = vunpack.c.l.b16 %v1463
  %v5164 = vunpack.c.l.b16 %v1464
  %v5165 = vunpack.c.l.b16 %v1465
  %v5166 = vunpack.c.l.b16 %v1466
  %v5167 = vunpack.c.l.b16 %v1467
  %v5168 = vunpack.c.l.b16 %v1468
  %v5169 = vunpack.c.l.b16 %v1469
  %v5170 = vunpack.c.l.b16 %v1470
  %v5171 = vunpack.c.l.b16 %v1471
  %v5172 = vunpack.c.l.b16 %v1472
  %v5173 = vunpack.c.l.b16 %v1473
  %v5174 = vunpack.c.l.b16 %v1474
  %v5175 = vunpack.c.l.b16 %v1475
  %v5176 = vunpack.c.l.b16 %v1476
  %v5177 = vunpack.c.l.b16 %v1477
  %v5178 = vunpack.c.l.b16 %v1478
  %v5179 = vunpack.c.l.b16 %v1479
  %v5180 = vunpack.c.l.b16 %v1480
  %v5181 = vunpack.c.l.b16 %v1481
  %v5182 = vunpack.c.l.b16 %v1482
  %v5183 = vunpack.c.l.b16 %v1483
  %v5184 = vunpack.c.l.b16 %v1484
  %v5185 = vunpack.c.l.b16 %v1485
  %v5186 = vunpack.c.l.b16 %v1486
  %v5187 = vunpack.c.l.b16 %v1487
  %v5188 = vunpack.c.l.b16 %v1488
  %v5189 = vunpack.c.l.b16 %v1489
  %v5190 = vunpack.c.l.b16 %v1490
  %v5191 = vunpack.c.l.b16 %v1491
  %v5192 = vunpack.c.l.b16 %v1492
  %v5193 = vunpack.c.l.b16 %v1493
  %v5194 = vunpack.c.l.b16 %v1494
  %v5195 = vunpack.c.l.b16 %v1495
  %v5196 = vunpack.c.l.b16 %v1496
  %v5197 = vunpack.c.l.b16 %v1497
  %v5198 = vunpack.c.l.b16 %v1498
  %v5199 = vunpack.c.l.b16 %v1499
  %v5200 = vunpack.c.l.b16 %v1500
  %v5201 = vunpack.c.l.b16 %v1501
  %v5202 = vunpack.c.l.b16 %v1502
  %v5203 = vunpack.c.l.b16 %v1503
  %v5204 = vunpack.c.l.b16 %v1504
  %v5205 = vunpack.c.l.b16 %v1505
  %v5206 = vunpack.c.l.b16 %v1506
  %v5207 = vunpack.c.l.b16 %v1507
  %v5208 = vunpack.c.l.b16 %v1508
  %v5209 = vunpack.c.l.b16 %v1509
  %v5210 = vunpack.c.l.b16 %v1510
  %v5211 = vunpack.c.l.b16 %v1511
  %v5212 = vunpack.c.l.b16 %v1512
  %v5213 = vunpack.c.l.b16 %v1513
  %v5214 = vunpack.c.l.b16 %v1514
  %v5215 = vunpack.c.l.b16 %v1515
  %v5216 = vunpack.c.l.b16 %v1516
  %v5217 = vunpack.c.l.b16 %v1517
  %v5218 = vunpack.c.l.b16 %v1518
  %v5219 = vunpack.c.l.b16 %v1519
  %v5220 = vunpack.c.l.b16 %v1520
  %v5221 = vunpack.c.l.b16 %v1521
  %v5222 = vunpack.c.l.b16 %v1522
  %v5223 = vunpack.c.l.b16 %v1523
  %v5224 = vunpack.c.l.b16 %v1524
  %v5225 = vunpack.c.l.b16 %v1525
  %v5226 = vunpack.c.l.b16 %v1526
  %v5227 = vunpack.c.l.b16 %v1527
  %v5228 = vunpack.c.l.b16 %v1528
  %v5229 = vunpack.c.l.b16 %v1529
  %v5230 = vunpack.c.l.b16 %v1530
  %v5231 = vunpack.c.l.b16 %v1531
  %v5232 = vunpack.c.l.b16 %v1532
  %v5233 = vunpack.c.l.b16 %v1533
  %v5234 = vunpack.c.l.b16 %v1534
  %v5235 = vunpack.c.l.b16 %v1535
  %v5236 = vunpack.c.l.b16 %v1536
  %v5237 = vunpack.c.l.b16 %v1537
  %v5238 = vunpack.c.l.b16 %v1538
  %v5239 = vunpack.c.l.b16 %v1539
  %v5240 = vunpack.c.l.b16 %v1540
  %v5241 = vunpack.c.l.b16 %v1541
  %v5242 = vunpack.c.l.b16 %v1542
  %v5243 = vunpack.c.l.b16 %v1543
  %v5244 = vunpack.c.l.b16 %v1544
  %v5245 = vunpack.c.l.b16 %v1545
  %v5246 = vunpack.c.l.b16 %v1546
  %v5247 = vunpack.c.l.b16 %v1547
  %v5248 = vunpack.c.l.b16 %v1548
  %v5249 = vunpack.c.l.b16 %v1549
  %v5250 = vunpack.c.l.b16 %v1550
  %v5251 = vunpack.c.l.b16 %v1551
  %v5252 = vunpack.c.l.b16 %v1552
  %v5253 = vunpack.c.l.b16 %v1553
  %v5254 = vunpack.c.l.b16 %v1554
  %v5255 = vunpack.c.l.b16 %v1555
  %v5256 = vunpack.c.l.b16 %v1556
  %v5257 = vunpack.c.l.b16 %v1557
  %v5258 = vunpack.c.l.b16 %v1558
  %v5259 = vunpack.c.l.b16 %v1559
  %v5260 = vunpack.c.l.b16 %v1560
  %v5261 = vunpack.c.l.b16 %v1561
  %v5262 = vunpack.c.l.b16 %v1562
  %v5263 = vunpack.c.l.b16 %v1563
  %v5264 = vunpack.c.l.b16 %v1564
  %v5265 = vunpack.c.l.b16 %v1565
  %v5266 = vunpack.c.l.b16 %v1566
  %v5267 = vunpack.c.l.b16 %v1567
  %v5268 = vunpack.c.l.b16 %v1568
  %v5269 = vunpack.c.l.b16 %v1569
  %v5270 = vunpack.c.l.b16 %v1570
  %v5271 = vunpack.c.l.b16 %v1571
  %v5272 = vunpack.c.l.b16 %v1572
  %v5273 = vunpack.c.l.b16 %v1573
  %v5274 = vunpack.c.l.b16 %v1574
  %v5275 = vunpack.c.l.b16 %v1575
  %v5276 = vunpack.c.l.b16 %v1576
  %v5277 = vunpack.c.l.b16 %v1577
  %v5278 = vunpack.c.l.b16 %v1578
  %v5279 = vunpack.c.l.b16 %v1579
  %v5280 = vunpack.c.l.b16 %v1580
  %v5281 = vunpack.c.l.b16 %v1581
  %v5282 = vunpack.c.l.b16 %v1582
  %v5283 = vunpack.c.l.b16 %v1583
  %v5284 = vunpack.c.l.b16 %v1584
  %v5285 = vunpack.c.l.b16 %v1585
  %v5286 = vunpack.c.l.b16 %v1586
  %v5287 = vunpack.c.l.b16 %v1587
  %v5288 = vunpack.c.l.b16 %v1588
  %v5289 = vunpack.c.l.b16 %v1589
  %v5290 = vunpack.c.l.b16 %v1590
  %v5291 = vunpack.c.l.b16 %v1591
  %v5292 = vunpack.c.l.b16 %v1592
  %v5293 = vunpack.c.l.b16 %v1593
  %v5294 = vunpack.c.l.b16 %v1594
  %v5295 = vunpack.c.l.b16 %v1595
  %v5296 = vunpack.c.l.b16 %v1596
  %v5297 = vunpack.c.l.b16 %v1597
  %v5298 = vunpack.c.l.b16 %v1598
  %v5299 = vunpack.c.l.b16 %v1599
  %v5300 = vunpack.c.l.b16 %v1600
  %v5301 = vunpack.c.l.b16 %v1601
  %v5302 = vunpack.c.l.b16 %v1602
  %v5303 = vunpack.c.l.b16 %v1603
  %v5304 = vunpack.c.l.b16 %v1604
  %v5305 = vunpack.c.l.b16 %v1605
  %v5306 = vunpack.c.l.b16 %v1606
  %v5307 = vunpack.c.l.b16 %v1607
  %v5308 = vunpack.c.l.b16 %v1608
  %v5309 = vunpack.c.l.b16 %v1609
  %v5310 = vunpack.c.l.b16 %v1610
  %v5311 = vunpack.c.l.b16 %v1611
  %v5312 = vunpack.c.l.b16 %v1612
  %v5313 = vunpack.c.l.b16 %v1613
  %v5314 = vunpack.c.l.b16 %v1614
  %v5315 = vunpack.c.l.b16 %v1615
  %v5316 = vunpack.c.l.b16 %v1616
  %v5317 = vunpack.c.l.b16 %v1617
  %v5318 = vunpack.c.l.b16 %v1618
  %v5319 = vunpack.c.l.b16 %v1619
  %v5320 = vunpack.c.l.b16 %v1620
  %v5321 = vunpack.c.l.b16 %v1621
  %v5322 = vunpack.c.l.b16 %v1622
  %v5323 = vunpack.c.l.b16 %v1623
  %v5324 = vunpack.c.l.b16 %v1624
  %v5325 = vunpack.c.l.b16 %v1625
  %v5326 = vunpack.c.l.b16 %v1626
  %v5327 = vunpack.c.l.b16 %v1627
  %v5328 = vunpack.c.l.b16 %v1628
  %v5329 = vunpack.c.l.b16 %v1629
  %v5330 = vunpack.c.l.b16 %v1630
  %v5331 = vunpack.c.l.b16 %v1631
  %v5332 = vunpack.c.l.b16 %v1632
  %v5333 = vunpack.c.l.b16 %v1633
  %v5334 = vunpack.c.l.b16 %v1634
  %v5335 = vunpack.c.l.b16 %v1635
  %v5336 = vunpack.c.l.b16 %v1636
  %v5337 = vunpack.c.l.b16 %v1637
  %v5338 = vunpack.c.l.b16 %v1638
  %v5339 = vunpack.c.l.b16 %v1639
  %v5340 = vunpack.c.l.b16 %v1640
  %v5341 = vunpack.c.l.b16 %v1641
  %v5342 = vunpack.c.l.b16 %v1642
  %v5343 = vunpack.c.l.b16 %v1643
  %v5344 = vunpack.c.l.b16 %v1644
  %v5345 = vunpack.c.l.b16 %v1645
  %v5346 = vunpack.c.l.b16 %v1646
  %v5347 = vunpack.c.l.b16 %v1647
  %v5348 = vunpack.c.l.b16 %v1648
  %v5349 = vunpack.c.l.b16 %v1649
  %v5350 = vunpack.c.l.b16 %v1650
  %v5351 = vunpack.c.l.b16 %v1651
  %v5352 = vunpack.c.l.b16 %v1652
  %v5353 = vunpack.c.l.b16 %v1653
  %v5354 = vunpack.c.l.b16 %v1654
  %v5355 = vunpack.c.l.b16 %v1655
  %v5356 = vunpack.c.l.b16 %v1656
  %v5357 = vunpack.c.l.b16 %v1657
  %v5358 = vunpack.c.l.b16 %v1658
  %v5359 = vunpack.c.l.b16 %v1659
  %v5360 = vunpack.c.l.b16 %v1660
  %v5361 = vunpack.c.l.b16 %v1661
  %v5362 = vunpack.c.l.b16 %v1662
  %v5363 = vunpack.c.l.b16 %v1663
  %v5364 = vunpack.c.l.b16 %v1664
  %v5365 = vunpack.c.l.b16 %v1665
  %v5366 = vunpack.c.l.b16 %v1666
  %v5367 = vunpack.c.l.b16 %v1667
  %v5368 = vunpack.c.l.b16 %v1668
  %v5369 = vunpack.c.l.b16 %v1669
  %v5370 = vunpack.c.l.b16 %v1670
  %v5371 = vunpack.c.l.b16 %v1671
  %v5372 = vunpack.c.l.b16 %v1672
  %v5373 = vunpack.c.l.b16 %v1673
  %v5374 = vunpack.c.l.b16 %v1674
  %v5375 = vunpack.c.l.b16 %v1675
  %v5376 = vunpack.c.l.b16 %v1676
  %v5377 = vunpack.c.l.b16 %v1677
  %v5378 = vunpack.c.l.b16 %v1678
  %v5379 = vunpack.c.l.b16 %v1679
  %v5380 = vunpack.c.l.b16 %v1680
  %v5381 = vunpack.c.l.b16 %v1681
  %v5382 = vunpack.c.l.b16 %v1682
  %v5383 = vunpack.c.l.b16 %v1683
  %v5384 = vunpack.c.l.b16 %v1684
  %v5385 = vunpack.c.l.b16 %v1685
  %v5386 = vunpack.c.l.b16 %v1686
  %v5387 = vunpack.c.l.b16 %v1687
  %v5388 = vunpack.c.l.b16 %v1688
  %v5389 = vunpack.c.l.b16 %v1689
  %v5390 = vunpack.c.l.b16 %v1690
  %v5391 = vunpack.c.l.b16 %v1691
  %v5392 = vunpack.c.l.b16 %v1692
  %v5393 = vunpack.c.l.b16 %v1693
  %v5394 = vunpack.c.l.b16 %v1694
  %v5395 = vunpack.c.l.b16 %v1695
  %v5396 = vunpack.c.l.b16 %v1696
  %v5397 = vunpack.c.l.b16 %v1697
  %v5398 = vunpack.c.l.b16 %v1698
  %v5399 = vunpack.c.l.b16 %v1699
  %v5400 = vunpack.c.l.b16 %v1700
  %v5401 = vunpack.c.l.b16 %v1701
  %v5402 = vunpack.c.l.b16 %v1702
  %v5403 = vunpack.c.l.b16 %v1703
  %v5404 = vunpack.c.l.b16 %v1704
  %v5405 = vunpack.c.l.b16 %v1705
  %v5406 = vunpack.c.l.b16 %v1706
  %v5407 = vunpack.c.l.b16 %v1707
  %v5408 = vunpack.c.l.b16 %v1708
  %v5409 = vunpack.c.l.b16 %v1709
  %v5410 = vunpack.c.l.b16 %v1710
  %v5411 = vunpack.c.l.b16 %v1711
  %v5412 = vunpack.c.l.b16 %v1712
  %v5413 = vunpack.c.l.b16 %v1713
  %v5414 = vunpack.c.l.b16 %v1714
  %v5415 = vunpack.c.l.b16 %v1715
  %v5416 = vunpack.c.l.b16 %v1716
  %v5417 = vpack.c.b16 %v3818, %v3817
  %v5418 = vpack.c.b16 %v3820, %v3819
  %v5419 = vpack.c.b16 %v3822, %v3821
  %v5420 = vpack.c.b16 %v3824, %v3823
  %v5421 = vpack.c.b16 %v3826, %v3825
  %v5422 = vpack.c.b16 %v3828, %v3827
  %v5423 = vpack.c.b16 %v3830, %v3829
  %v5424 = vpack.c.b16 %v3832, %v3831
  %v5425 = vpack.c.b16 %v3834, %v3833
  %v5426 = vpack.c.b16 %v3836, %v3835
  %v5427 = vpack.c.b16 %v3838, %v3837
  %v5428 = vpack.c.b16 %v3840, %v3839
  %v5429 = vpack.c.b16 %v3842, %v3841
  %v5430 = vpack.c.b16 %v3844, %v3843
  %v5431 = vpack.c.b16 %v3846, %v3845
  %v5432 = vpack.c.b16 %v3848, %v3847
  %v5433 = vpack.c.b16 %v3850, %v3849
  %v5434 = vpack.c.b16 %v3852, %v3851
  %v5435 = vpack.c.b16 %v3854, %v3853
  %v5436 = vpack.c.b16 %v3856, %v3855
  %v5437 = vpack.c.b16 %v3858, %v3857
  %v5438 = vpack.c.b16 %v3860, %v3859
  %v5439 = vpack.c.b16 %v3862, %v3861
  %v5440 = vpack.c.b16 %v3864, %v3863
  %v5441 = vpack.c.b16 %v3866, %v3865
  %v5442 = vpack.c.b16 %v3868, %v3867
  %v5443 = vpack.c.b16 %v3870, %v3869
  %v5444 = vpack.c.b16 %v3872, %v3871
  %v5445 = vpack.c.b16 %v3874, %v3873
  %v5446 = vpack.c.b16 %v3876, %v3875
  %v5447 = vpack.c.b16 %v3878, %v3877
  %v5448 = vpack.c.b16 %v3880, %v3879
  %v5449 = vpack.c.b16 %v3882, %v3881
  %v5450 = vpack.c.b16 %v3884, %v3883
  %v5451 = vpack.c.b16 %v3886, %v3885
  %v5452 = vpack.c.b16 %v3888, %v3887
  %v5453 = vpack.c.b16 %v3890, %v3889
  %v5454 = vpack.c.b16 %v3892, %v3891
  %v5455 = vpack.c.b16 %v3894, %v3893
  %v5456 = vpack.c.b16 %v3896, %v3895
  %v5457 = vpack.c.b16 %v3898, %v3897
  %v5458 = vpack.c.b16 %v3900, %v3899
  %v5459 = vpack.c.b16 %v3902, %v3901
  %v5460 = vpack.c.b16 %v3904, %v3903
  %v5461 = vpack.c.b16 %v3906, %v3905
  %v5462 = vpack.c.b16 %v3908, %v3907
  %v5463 = vpack.c.b16 %v3910, %v3909
  %v5464 = vpack.c.b16 %v3912, %v3911
  %v5465 = vpack.c.b16 %v3914, %v3913
  %v5466 = vpack.c.b16 %v3916, %v3915
  %v5467 = vpack.c.b16 %v3918, %v3917
  %v5468 = vpack.c.b16 %v3920, %v3919
  %v5469 = vpack.c.b16 %v3922, %v3921
  %v5470 = vpack.c.b16 %v3924, %v3923
  %v5471 = vpack.c.b16 %v3926, %v3925
  %v5472 = vpack.c.b16 %v3928, %v3927
  %v5473 = vpack.c.b16 %v3930, %v3929
  %v5474 = vpack.c.b16 %v3932, %v3931
  %v5475 = vpack.c.b16 %v3934, %v3933
  %v5476 = vpack.c.b16 %v3936, %v3935
  %v5477 = vpack.c.b16 %v3938, %v3937
  %v5478 = vpack.c.b16 %v3940, %v3939
  %v5479 = vpack.c.b16 %v3942, %v3941
  %v5480 = vpack.c.b16 %v3944, %v3943
  %v5481 = vpack.c.b16 %v3946, %v3945
  %v5482 = vpack.c.b16 %v3948, %v3947
  %v5483 = vpack.c.b16 %v3950, %v3949
  %v5484 = vpack.c.b16 %v3952, %v3951
  %v5485 = vpack.c.b16 %v3954, %v3953
  %v5486 = vpack.c.b16 %v3956, %v3955
  %v5487 = vpack.c.b16 %v3958, %v3957
  %v5488 = vpack.c.b16 %v3960, %v3959
  %v5489 = vpack.c.b16 %v3962, %v3961
  %v5490 = vpack.c.b16 %v3964, %v3963
  %v5491 = vpack.c.b16 %v3966, %v3965
  %v5492 = vpack.c.b16 %v3968, %v3967
  %v5493 = vpack.c.b16 %v3970, %v3969
  %v5494 = vpack.c.b16 %v3972, %v3971
  %v5495 = vpack.c.b16 %v3974, %v3973
  %v5496 = vpack.c.b16 %v3976, %v3975
  %v5497 = vpack.c.b16 %v3978, %v3977
  %v5498 = vpack.c.b16 %v3980, %v3979
  %v5499 = vpack.c.b16 %v3982, %v3981
  %v5500 = vpack.c.b16 %v3984, %v3983
  %v5501 = vpack.c.b16 %v3986, %v3985
  %v5502 = vpack.c.b16 %v3988, %v3987
  %v5503 = vpack.c.b16 %v3990, %v3989
  %v5504 = vpack.c.b16 %v3992, %v3991
  %v5505 = vpack.c.b16 %v3994, %v3993
  %v5506 = vpack.c.b16 %v3996, %v3995
  %v5507 = vpack.c.b16 %v3998, %v3997
  %v5508 = vpack.c.b16 %v4000, %v3999
  %v5509 = vpack.c.b16 %v4002, %v4001
  %v5510 = vpack.c.b16 %v4004, %v4003
  %v5511 = vpack.c.b16 %v4006, %v4005
  %v5512 = vpack.c.b16 %v4008, %v4007
  %v5513 = vpack.c.b16 %v4010, %v4009
  %v5514 = vpack.c.b16 %v4012, %v4011
  %v5515 = vpack.c.b16 %v4014, %v4013
  %v5516 = vpack.c.b16 %v4016, %v4015
  %v5517 = vpack.c.b16 %v4018, %v4017
  %v5518 = vpack.c.b16 %v4020, %v4019
  %v5519 = vpack.c.b16 %v4022, %v4021
  %v5520 = vpack.c.b16 %v4024, %v4023
  %v5521 = vpack.c.b16 %v4026, %v4025
  %v5522 = vpack.c.b16 %v4028, %v4027
  %v5523 = vpack.c.b16 %v4030, %v4029
  %v5524 = vpack.c.b16 %v4032, %v4031
  %v5525 = vpack.c.b16 %v4034, %v4033
  %v5526 = vpack.c.b16 %v4036, %v4035
  %v5527 = vpack.c.b16 %v4038, %v4037
  %v5528 = vpack.c.b16 %v4040, %v4039
  %v5529 = vpack.c.b16 %v4042, %v4041
  %v5530 = vpack.c.b16 %v4044, %v4043
  %v5531 = vpack.c.b16 %v4046, %v4045
  %v5532 = vpack.c.b16 %v4048, %v4047
  %v5533 = vpack.c.b16 %v4050, %v4049
  %v5534 = vpack.c.b16 %v4052, %v4051
  %v5535 = vpack.c.b16 %v4054, %v4053
  %v5536 = vpack.c.b16 %v4056, %v4055
  %v5537 = vpack.c.b16 %v4058, %v4057
  %v5538 = vpack.c.b16 %v4060, %v4059
  %v5539 = vpack.c.b16 %v4062, %v4061
  %v5540 = vpack.c.b16 %v4064, %v4063
  %v5541 = vpack.c.b16 %v4066, %v4065
  %v5542 = vpack.c.b16 %v4068, %v4067
  %v5543 = vpack.c.b16 %v4070, %v4069
  %v5544 = vpack.c.b16 %v4072, %v4071
  %v5545 = vpack.c.b16 %v4074, %v4073
  %v5546 = vpack.c.b16 %v4076, %v4075
  %v5547 = vpack.c.b16 %v4078, %v4077
  %v5548 = vpack.c.b16 %v4080, %v4079
  %v5549 = vpack.c.b16 %v4082, %v4081
  %v5550 = vpack.c.b16 %v4084, %v4083
  %v5551 = vpack.c.b16 %v4086, %v4085
  %v5552 = vpack.c.b16 %v4088, %v4087
  %v5553 = vpack.c.b16 %v4090, %v4089
  %v5554 = vpack.c.b16 %v4092, %v4091
  %v5555 = vpack.c.b16 %v4094, %v4093
  %v5556 = vpack.c.b16 %v4096, %v4095
  %v5557 = vpack.c.b16 %v4098, %v4097
  %v5558 = vpack.c.b16 %v4100, %v4099
  %v5559 = vpack.c.b16 %v4102, %v4101
  %v5560 = vpack.c.b16 %v4104, %v4103
  %v5561 = vpack.c.b16 %v4106, %v4105
  %v5562 = vpack.c.b16 %v4108, %v4107
  %v5563 = vpack.c.b16 %v4110, %v4109
  %v5564 = vpack.c.b16 %v4112, %v4111
  %v5565 = vpack.c.b16 %v4114, %v4113
  %v5566 = vpack.c.b16 %v4116, %v4115
  %v5567 = vpack.c.b16 %v4118, %v4117
  %v5568 = vpack.c.b16 %v4120, %v4119
  %v5569 = vpack.c.b16 %v4122, %v4121
  %v5570 = vpack.c.b16 %v4124, %v4123
  %v5571 = vpack.c.b16 %v4126, %v4125
  %v5572 = vpack.c.b16 %v4128, %v4127
  %v5573 = vpack.c.b16 %v4130, %v4129
  %v5574 = vpack.c.b16 %v4132, %v4131
  %v5575 = vpack.c.b16 %v4134, %v4133
  %v5576 = vpack.c.b16 %v4136, %v4135
  %v5577 = vpack.c.b16 %v4138, %v4137
  %v5578 = vpack.c.b16 %v4140, %v4139
  %v5579 = vpack.c.b16 %v4142, %v4141
  %v5580 = vpack.c.b16 %v4144, %v4143
  %v5581 = vpack.c.b16 %v4146, %v4145
  %v5582 = vpack.c.b16 %v4148, %v4147
  %v5583 = vpack.c.b16 %v4150, %v4149
  %v5584 = vpack.c.b16 %v4152, %v4151
  %v5585 = vpack.c.b16 %v4154, %v4153
  %v5586 = vpack.c.b16 %v4156, %v4155
  %v5587 = vpack.c.b16 %v4158, %v4157
  %v5588 = vpack.c.b16 %v4160, %v4159
  %v5589 = vpack.c.b16 %v4162, %v4161
  %v5590 = vpack.c.b16 %v4164, %v4163
  %v5591 = vpack.c.b16 %v4166, %v4165
  %v5592 = vpack.c.b16 %v4168, %v4167
  %v5593 = vpack.c.b16 %v4170, %v4169
  %v5594 = vpack.c.b16 %v4172, %v4171
  %v5595 = vpack.c.b16 %v4174, %v4173
  %v5596 = vpack.c.b16 %v4176, %v4175
  %v5597 = vpack.c.b16 %v4178, %v4177
  %v5598 = vpack.c.b16 %v4180, %v4179
  %v5599 = vpack.c.b16 %v4182, %v4181
  %v5600 = vpack.c.b16 %v4184, %v4183
  %v5601 = vpack.c.b16 %v4186, %v4185
  %v5602 = vpack.c.b16 %v4188, %v4187
  %v5603 = vpack.c.b16 %v4190, %v4189
  %v5604 = vpack.c.b16 %v4192, %v4191
  %v5605 = vpack.c.b16 %v4194, %v4193
  %v5606 = vpack.c.b16 %v4196, %v4195
  %v5607 = vpack.c.b16 %v4198, %v4197
  %v5608 = vpack.c.b16 %v4200, %v4199
  %v5609 = vpack.c.b16 %v4202, %v4201
  %v5610 = vpack.c.b16 %v4204, %v4203
  %v5611 = vpack.c.b16 %v4206, %v4205
  %v5612 = vpack.c.b16 %v4208, %v4207
  %v5613 = vpack.c.b16 %v4210, %v4209
  %v5614 = vpack.c.b16 %v4212, %v4211
  %v5615 = vpack.c.b16 %v4214, %v4213
  %v5616 = vpack.c.b16 %v4216, %v4215
  %v5617 = vpack.c.b16 %v4218, %v4217
  %v5618 = vpack.c.b16 %v4220, %v4219
  %v5619 = vpack.c.b16 %v4222, %v4221
  %v5620 = vpack.c.b16 %v4224, %v4223
  %v5621 = vpack.c.b16 %v4226, %v4225
  %v5622 = vpack.c.b16 %v4228, %v4227
  %v5623 = vpack.c.b16 %v4230, %v4229
  %v5624 = vpack.c.b16 %v4232, %v4231
  %v5625 = vpack.c.b16 %v4234, %v4233
  %v5626 = vpack.c.b16 %v4236, %v4235
  %v5627 = vpack.c.b16 %v4238, %v4237
  %v5628 = vpack.c.b16 %v4240, %v4239
  %v5629 = vpack.c.b16 %v4242, %v4241
  %v5630 = vpack.c.b16 %v4244, %v4243
  %v5631 = vpack.c.b16 %v4246, %v4245
  %v5632 = vpack.c.b16 %v4248, %v4247
  %v5633 = vpack.c.b16 %v4250, %v4249
  %v5634 = vpack.c.b16 %v4252, %v4251
  %v5635 = vpack.c.b16 %v4254, %v4253
  %v5636 = vpack.c.b16 %v4256, %v4255
  %v5637 = vpack.c.b16 %v4258, %v4257
  %v5638 = vpack.c.b16 %v4260, %v4259
  %v5639 = vpack.c.b16 %v4262, %v4261
  %v5640 = vpack.c.b16 %v4264, %v4263
  %v5641 = vpack.c.b16 %v4266, %v4265
  %v5642 = vpack.c.b16 %v4268, %v4267
  %v5643 = vpack.c.b16 %v4270, %v4269
  %v5644 = vpack.c.b16 %v4272, %v4271
  %v5645 = vpack.c.b16 %v4274, %v4273
  %v5646 = vpack.c.b16 %v4276, %v4275
  %v5647 = vpack.c.b16 %v4278, %v4277
  %v5648 = vpack.c.b16 %v4280, %v4279
  %v5649 = vpack.c.b16 %v4282, %v4281
  %v5650 = vpack.c.b16 %v4284, %v4283
  %v5651 = vpack.c.b16 %v4286, %v4285
  %v5652 = vpack.c.b16 %v4288, %v4287
  %v5653 = vpack.c.b16 %v4290, %v4289
  %v5654 = vpack.c.b16 %v4292, %v4291
  %v5655 = vpack.c.b16 %v4294, %v4293
  %v5656 = vpack.c.b16 %v4296, %v4295
  %v5657 = vpack.c.b16 %v4298, %v4297
  %v5658 = vpack.c.b16 %v4300, %v4299
  %v5659 = vpack.c.b16 %v4302, %v4301
  %v5660 = vpack.c.b16 %v4304, %v4303
  %v5661 = vpack.c.b16 %v4306, %v4305
  %v5662 = vpack.c.b16 %v4308, %v4307
  %v5663 = vpack.c.b16 %v4310, %v4309
  %v5664 = vpack.c.b16 %v4312, %v4311
  %v5665 = vpack.c.b16 %v4314, %v4313
  %v5666 = vpack.c.b16 %v4316, %v4315
  %v5667 = vpack.c.b16 %v4318, %v4317
  %v5668 = vpack.c.b16 %v4320, %v4319
  %v5669 = vpack.c.b16 %v4322, %v4321
  %v5670 = vpack.c.b16 %v4324, %v4323
  %v5671 = vpack.c.b16 %v4326, %v4325
  %v5672 = vpack.c.b16 %v4328, %v4327
  %v5673 = vpack.c.b16 %v4330, %v4329
  %v5674 = vpack.c.b16 %v4332, %v4331
  %v5675 = vpack.c.b16 %v4334, %v4333
  %v5676 = vpack.c.b16 %v4336, %v4335
  %v5677 = vpack.c.b16 %v4338, %v4337
  %v5678 = vpack.c.b16 %v4340, %v4339
  %v5679 = vpack.c.b16 %v4342, %v4341
  %v5680 = vpack.c.b16 %v4344, %v4343
  %v5681 = vpack.c.b16 %v4346, %v4345
  %v5682 = vpack.c.b16 %v4348, %v4347
  %v5683 = vpack.c.b16 %v4350, %v4349
  %v5684 = vpack.c.b16 %v4352, %v4351
  %v5685 = vpack.c.b16 %v4354, %v4353
  %v5686 = vpack.c.b16 %v4356, %v4355
  %v5687 = vpack.c.b16 %v4358, %v4357
  %v5688 = vpack.c.b16 %v4360, %v4359
  %v5689 = vpack.c.b16 %v4362, %v4361
  %v5690 = vpack.c.b16 %v4364, %v4363
  %v5691 = vpack.c.b16 %v4366, %v4365
  %v5692 = vpack.c.b16 %v4368, %v4367
  %v5693 = vpack.c.b16 %v4370, %v4369
  %v5694 = vpack.c.b16 %v4372, %v4371
  %v5695 = vpack.c.b16 %v4374, %v4373
  %v5696 = vpack.c.b16 %v4376, %v4375
  %v5697 = vpack.c.b16 %v4378, %v4377
  %v5698 = vpack.c.b16 %v4380, %v4379
  %v5699 = vpack.c.b16 %v4382, %v4381
  %v5700 = vpack.c.b16 %v4384, %v4383
  %v5701 = vpack.c.b16 %v4386, %v4385
  %v5702 = vpack.c.b16 %v4388, %v4387
  %v5703 = vpack.c.b16 %v4390, %v4389
  %v5704 = vpack.c.b16 %v4392, %v4391
  %v5705 = vpack.c.b16 %v4394, %v4393
  %v5706 = vpack.c.b16 %v4396, %v4395
  %v5707 = vpack.c.b16 %v4398, %v4397
  %v5708 = vpack.c.b16 %v4400, %v4399
  %v5709 = vpack.c.b16 %v4402, %v4401
  %v5710 = vpack.c.b16 %v4404, %v4403
  %v5711 = vpack.c.b16 %v4406, %v4405
  %v5712 = vpack.c.b16 %v4408, %v4407
  %v5713 = vpack.c.b16 %v4410, %v4409
  %v5714 = vpack.c.b16 %v4412, %v4411
  %v5715 = vpack.c.b16 %v4414, %v4413
  %v5716 = vpack.c.b16 %v4416, %v4415
  %v5717 = vpack.c.b16 %v4418, %v4417
  %v5718 = vpack.c.b16 %v4420, %v4419
  %v5719 = vpack.c.b16 %v4422, %v4421
  %v5720 = vpack.c.b16 %v4424, %v4423
  %v5721 = vpack.c.b16 %v4426, %v4425
  %v5722 = vpack.c.b16 %v4428, %v4427
  %v5723 = vpack.c.b16 %v4430, %v4429
  %v5724 = vpack.c.b16 %v4432, %v4431
  %v5725 = vpack.c.b16 %v4434, %v4433
  %v5726 = vpack.c.b16 %v4436, %v4435
  %v5727 = vpack.c.b16 %v4438, %v4437
  %v5728 = vpack.c.b16 %v4440, %v4439
  %v5729 = vpack.c.b16 %v4442, %v4441
  %v5730 = vpack.c.b16 %v4444, %v4443
  %v5731 = vpack.c.b16 %v4446, %v4445
  %v5732 = vpack.c.b16 %v4448, %v4447
  %v5733 = vpack.c.b16 %v4450, %v4449
  %v5734 = vpack.c.b16 %v4452, %v4451
  %v5735 = vpack.c.b16 %v4454, %v4453
  %v5736 = vpack.c.b16 %v4456, %v4455
  %v5737 = vpack.c.b16 %v4458, %v4457
  %v5738 = vpack.c.b16 %v4460, %v4459
  %v5739 = vpack.c.b16 %v4462, %v4461
  %v5740 = vpack.c.b16 %v4464, %v4463
  %v5741 = vpack.c.b16 %v4466, %v4465
  %v5742 = vpack.c.b16 %v4468, %v4467
  %v5743 = vpack.c.b16 %v4470, %v4469
  %v5744 = vpack.c.b16 %v4472, %v4471
  %v5745 = vpack.c.b16 %v4474, %v4473
  %v5746 = vpack.c.b16 %v4476, %v4475
  %v5747 = vpack.c.b16 %v4478, %v4477
  %v5748 = vpack.c.b16 %v4480, %v4479
  %v5749 = vpack.c.b16 %v4482, %v4481
  %v5750 = vpack.c.b16 %v4484, %v4483
  %v5751 = vpack.c.b16 %v4486, %v4485
  %v5752 = vpack.c.b16 %v4488, %v4487
  %v5753 = vpack.c.b16 %v4490, %v4489
  %v5754 = vpack.c.b16 %v4492, %v4491
  %v5755 = vpack.c.b16 %v4494, %v4493
  %v5756 = vpack.c.b16 %v4496, %v4495
  %v5757 = vpack.c.b16 %v4498, %v4497
  %v5758 = vpack.c.b16 %v4500, %v4499
  %v5759 = vpack.c.b16 %v4502, %v4501
  %v5760 = vpack.c.b16 %v4504, %v4503
  %v5761 = vpack.c.b16 %v4506, %v4505
  %v5762 = vpack.c.b16 %v4508, %v4507
  %v5763 = vpack.c.b16 %v4510, %v4509
  %v5764 = vpack.c.b16 %v4512, %v4511
  %v5765 = vpack.c.b16 %v4514, %v4513
  %v5766 = vpack.c.b16 %v4516, %v4515
  %v5767 = vpack.c.b16 %v4518, %v4517
  %v5768 = vpack.c.b16 %v4520, %v4519
  %v5769 = vpack.c.b16 %v4522, %v4521
  %v5770 = vpack.c.b16 %v4524, %v4523
  %v5771 = vpack.c.b16 %v4526, %v4525
  %v5772 = vpack.c.b16 %v4528, %v4527
  %v5773 = vpack.c.b16 %v4530, %v4529
  %v5774 = vpack.c.b16 %v4532, %v4531
  %v5775 = vpack.c.b16 %v4534, %v4533
  %v5776 = vpack.c.b16 %v4536, %v4535
  %v5777 = vpack.c.b16 %v4538, %v4537
  %v5778 = vpack.c.b16 %v4540, %v4539
  %v5779 = vpack.c.b16 %v4542, %v4541
  %v5780 = vpack.c.b16 %v4544, %v4543
  %v5781 = vpack.c.b16 %v4546, %v4545
  %v5782 = vpack.c.b16 %v4548, %v4547
  %v5783 = vpack.c.b16 %v4550, %v4549
  %v5784 = vpack.c.b16 %v4552, %v4551
  %v5785 = vpack.c.b16 %v4554, %v4553
  %v5786 = vpack.c.b16 %v4556, %v4555
  %v5787 = vpack.c.b16 %v4558, %v4557
  %v5788 = vpack.c.b16 %v4560, %v4559
  %v5789 = vpack.c.b16 %v4562, %v4561
  %v5790 = vpack.c.b16 %v4564, %v4563
  %v5791 = vpack.c.b16 %v4566, %v4565
  %v5792 = vpack.c.b16 %v4568, %v4567
  %v5793 = vpack.c.b16 %v4570, %v4569
  %v5794 = vpack.c.b16 %v4572, %v4571
  %v5795 = vpack.c.b16 %v4574, %v4573
  %v5796 = vpack.c.b16 %v4576, %v4575
  %v5797 = vpack.c.b16 %v4578, %v4577
  %v5798 = vpack.c.b16 %v4580, %v4579
  %v5799 = vpack.c.b16 %v4582, %v4581
  %v5800 = vpack.c.b16 %v4584, %v4583
  %v5801 = vpack.c.b16 %v4586, %v4585
  %v5802 = vpack.c.b16 %v4588, %v4587
  %v5803 = vpack.c.b16 %v4590, %v4589
  %v5804 = vpack.c.b16 %v4592, %v4591
  %v5805 = vpack.c.b16 %v4594, %v4593
  %v5806 = vpack.c.b16 %v4596, %v4595
  %v5807 = vpack.c.b16 %v4598, %v4597
  %v5808 = vpack.c.b16 %v4600, %v4599
  %v5809 = vpack.c.b16 %v4602, %v4601
  %v5810 = vpack.c.b16 %v4604, %v4603
  %v5811 = vpack.c.b16 %v4606, %v4605
  %v5812 = vpack.c.b16 %v4608, %v4607
  %v5813 = vpack.c.b16 %v4610, %v4609
  %v5814 = vpack.c.b16 %v4612, %v4611
  %v5815 = vpack.c.b16 %v4614, %v4613
  %v5816 = vpack.c.b16 %v4616, %v4615
  %v5817 = vpack.c.b16 %v4618, %v4617
  %v5818 = vpack.c.b16 %v4620, %v4619
  %v5819 = vpack.c.b16 %v4622, %v4621
  %v5820 = vpack.c.b16 %v4624, %v4623
  %v5821 = vpack.c.b16 %v4626, %v4625
  %v5822 = vpack.c.b16 %v4628, %v4627
  %v5823 = vpack.c.b16 %v4630, %v4629
  %v5824 = vpack.c.b16 %v4632, %v4631
  %v5825 = vpack.c.b16 %v4634, %v4633
  %v5826 = vpack.c.b16 %v4636, %v4635
  %v5827 = vpack.c.b16 %v4638, %v4637
  %v5828 = vpack.c.b16 %v4640, %v4639
  %v5829 = vpack.c.b16 %v4642, %v4641
  %v5830 = vpack.c.b16 %v4644, %v4643
  %v5831 = vpack.c.b16 %v4646, %v4645
  %v5832 = vpack.c.b16 %v4648, %v4647
  %v5833 = vpack.c.b16 %v4650, %v4649
  %v5834 = vpack.c.b16 %v4652, %v4651
  %v5835 = vpack.c.b16 %v4654, %v4653
  %v5836 = vpack.c.b16 %v4656, %v4655
  %v5837 = vpack.c.b16 %v4658, %v4657
  %v5838 = vpack.c.b16 %v4660, %v4659
  %v5839 = vpack.c.b16 %v4662, %v4661
  %v5840 = vpack.c.b16 %v4664, %v4663
  %v5841 = vpack.c.b16 %v4666, %v4665
  %v5842 = vpack.c.b16 %v4668, %v4667
  %v5843 = vpack.c.b16 %v4670, %v4669
  %v5844 = vpack.c.b16 %v4672, %v4671
  %v5845 = vpack.c.b16 %v4674, %v4673
  %v5846 = vpack.c.b16 %v4676, %v4675
  %v5847 = vpack.c.b16 %v4678, %v4677
  %v5848 = vpack.c.b16 %v4680, %v4679
  %v5849 = vpack.c.b16 %v4682, %v4681
  %v5850 = vpack.c.b16 %v4684, %v4683
  %v5851 = vpack.c.b16 %v4686, %v4685
  %v5852 = vpack.c.b16 %v4688, %v4687
  %v5853 = vpack.c.b16 %v4690, %v4689
  %v5854 = vpack.c.b16 %v4692, %v4691
  %v5855 = vpack.c.b16 %v4694, %v4693
  %v5856 = vpack.c.b16 %v4696, %v4695
  %v5857 = vpack.c.b16 %v4698, %v4697
  %v5858 = vpack.c.b16 %v4700, %v4699
  %v5859 = vpack.c.b16 %v4702, %v4701
  %v5860 = vpack.c.b16 %v4704, %v4703
  %v5861 = vpack.c.b16 %v4706, %v4705
  %v5862 = vpack.c.b16 %v4708, %v4707
  %v5863 = vpack.c.b16 %v4710, %v4709
  %v5864 = vpack.c.b16 %v4712, %v4711
  %v5865 = vpack.c.b16 %v4714, %v4713
  %v5866 = vpack.c.b16 %v4716, %v4715
  %v5867 = vpack.c.b16 %v4718, %v4717
  %v5868 = vpack.c.b16 %v4720, %v4719
  %v5869 = vpack.c.b16 %v4722, %v4721
  %v5870 = vpack.c.b16 %v4724, %v4723
  %v5871 = vpack.c.b16 %v4726, %v4725
  %v5872 = vpack.c.b16 %v4728, %v4727
  %v5873 = vpack.c.b16 %v4730, %v4729
  %v5874 = vpack.c.b16 %v4732, %v4731
  %v5875 = vpack.c.b16 %v4734, %v4733
  %v5876 = vpack.c.b16 %v4736, %v4735
  %v5877 = vpack.c.b16 %v4738, %v4737
  %v5878 = vpack.c.b16 %v4740, %v4739
  %v5879 = vpack.c.b16 %v4742, %v4741
  %v5880 = vpack.c.b16 %v4744, %v4743
  %v5881 = vpack.c.b16 %v4746, %v4745
  %v5882 = vpack.c.b16 %v4748, %v4747
  %v5883 = vpack.c.b16 %v4750, %v4749
  %v5884 = vpack.c.b16 %v4752, %v4751
  %v5885 = vpack.c.b16 %v4754, %v4753
  %v5886 = vpack.c.b16 %v4756, %v4755
  %v5887 = vpack.c.b16 %v4758, %v4757
  %v5888 = vpack.c.b16 %v4760, %v4759
  %v5889 = vpack.c.b16 %v4762, %v4761
  %v5890 = vpack.c.b16 %v4764, %v4763
  %v5891 = vpack.c.b16 %v4766, %v4765
  %v5892 = vpack.c.b16 %v4768, %v4767
  %v5893 = vpack.c.b16 %v4770, %v4769
  %v5894 = vpack.c.b16 %v4772, %v4771
  %v5895 = vpack.c.b16 %v4774, %v4773
  %v5896 = vpack.c.b16 %v4776, %v4775
  %v5897 = vpack.c.b16 %v4778, %v4777
  %v5898 = vpack.c.b16 %v4780, %v4779
  %v5899 = vpack.c.b16 %v4782, %v4781
  %v5900 = vpack.c.b16 %v4784, %v4783
  %v5901 = vpack.c.b16 %v4786, %v4785
  %v5902 = vpack.c.b16 %v4788, %v4787
  %v5903 = vpack.c.b16 %v4790, %v4789
  %v5904 = vpack.c.b16 %v4792, %v4791
  %v5905 = vpack.c.b16 %v4794, %v4793
  %v5906 = vpack.c.b16 %v4796, %v4795
  %v5907 = vpack.c.b16 %v4798, %v4797
  %v5908 = vpack.c.b16 %v4800, %v4799
  %v5909 = vpack.c.b16 %v4802, %v4801
  %v5910 = vpack.c.b16 %v4804, %v4803
  %v5911 = vpack.c.b16 %v4806, %v4805
  %v5912 = vpack.c.b16 %v4808, %v4807
  %v5913 = vpack.c.b16 %v4810, %v4809
  %v5914 = vpack.c.b16 %v4812, %v4811
  %v5915 = vpack.c.b16 %v4814, %v4813
  %v5916 = vpack.c.b16 %v4816, %v4815
  %v5917 = vpack.c.b16 %v4818, %v4817
  %v5918 = vpack.c.b16 %v4820, %v4819
  %v5919 = vpack.c.b16 %v4822, %v4821
  %v5920 = vpack.c.b16 %v4824, %v4823
  %v5921 = vpack.c.b16 %v4826, %v4825
  %v5922 = vpack.c.b16 %v4828, %v4827
  %v5923 = vpack.c.b16 %v4830, %v4829
  %v5924 = vpack.c.b16 %v4832, %v4831
  %v5925 = vpack.c.b16 %v4834, %v4833
  %v5926 = vpack.c.b16 %v4836, %v4835
  %v5927 = vpack.c.b16 %v4838, %v4837
  %v5928 = vpack.c.b16 %v4840, %v4839
  %v5929 = vpack.c.b16 %v4842, %v4841
  %v5930 = vpack.c.b16 %v4844, %v4843
  %v5931 = vpack.c.b16 %v4846, %v4845
  %v5932 = vpack.c.b16 %v4848, %v4847
  %v5933 = vpack.c.b16 %v4850, %v4849
  %v5934 = vpack.c.b16 %v4852, %v4851
  %v5935 = vpack.c.b16 %v4854, %v4853
  %v5936 = vpack.c.b16 %v4856, %v4855
  %v5937 = vpack.c.b16 %v4858, %v4857
  %v5938 = vpack.c.b16 %v4860, %v4859
  %v5939 = vpack.c.b16 %v4862, %v4861
  %v5940 = vpack.c.b16 %v4864, %v4863
  %v5941 = vpack.c.b16 %v4866, %v4865
  %v5942 = vpack.c.b16 %v4868, %v4867
  %v5943 = vpack.c.b16 %v4870, %v4869
  %v5944 = vpack.c.b16 %v4872, %v4871
  %v5945 = vpack.c.b16 %v4874, %v4873
  %v5946 = vpack.c.b16 %v4876, %v4875
  %v5947 = vpack.c.b16 %v4878, %v4877
  %v5948 = vpack.c.b16 %v4880, %v4879
  %v5949 = vpack.c.b16 %v4882, %v4881
  %v5950 = vpack.c.b16 %v4884, %v4883
  %v5951 = vpack.c.b16 %v4886, %v4885
  %v5952 = vpack.c.b16 %v4888, %v4887
  %v5953 = vpack.c.b16 %v4890, %v4889
  %v5954 = vpack.c.b16 %v4892, %v4891
  %v5955 = vpack.c.b16 %v4894, %v4893
  %v5956 = vpack.c.b16 %v4896, %v4895
  %v5957 = vpack.c.b16 %v4898, %v4897
  %v5958 = vpack.c.b16 %v4900, %v4899
  %v5959 = vpack.c.b16 %v4902, %v4901
  %v5960 = vpack.c.b16 %v4904, %v4903
  %v5961 = vpack.c.b16 %v4906, %v4905
  %v5962 = vpack.c.b16 %v4908, %v4907
  %v5963 = vpack.c.b16 %v4910, %v4909
  %v5964 = vpack.c.b16 %v4912, %v4911
  %v5965 = vpack.c.b16 %v4914, %v4913
  %v5966 = vpack.c.b16 %v4916, %v4915
  %v5967 = vpack.c.b16 %v4918, %v4917
  %v5968 = vpack.c.b16 %v4920, %v4919
  %v5969 = vpack.c.b16 %v4922, %v4921
  %v5970 = vpack.c.b16 %v4924, %v4923
  %v5971 = vpack.c.b16 %v4926, %v4925
  %v5972 = vpack.c.b16 %v4928, %v4927
  %v5973 = vpack.c.b16 %v4930, %v4929
  %v5974 = vpack.c.b16 %v4932, %v4931
  %v5975 = vpack.c.b16 %v4934, %v4933
  %v5976 = vpack.c.b16 %v4936, %v4935
  %v5977 = vpack.c.b16 %v4938, %v4937
  %v5978 = vpack.c.b16 %v4940, %v4939
  %v5979 = vpack.c.b16 %v4942, %v4941
  %v5980 = vpack.c.b16 %v4944, %v4943
  %v5981 = vpack.c.b16 %v4946, %v4945
  %v5982 = vpack.c.b16 %v4948, %v4947
  %v5983 = vpack.c.b16 %v4950, %v4949
  %v5984 = vpack.c.b16 %v4952, %v4951
  %v5985 = vpack.c.b16 %v4954, %v4953
  %v5986 = vpack.c.b16 %v4956, %v4955
  %v5987 = vpack.c.b16 %v4958, %v4957
  %v5988 = vpack.c.b16 %v4960, %v4959
  %v5989 = vpack.c.b16 %v4962, %v4961
  %v5990 = vpack.c.b16 %v4964, %v4963
  %v5991 = vpack.c.b16 %v4966, %v4965
  %v5992 = vpack.c.b16 %v4968, %v4967
  %v5993 = vpack.c.b16 %v4970, %v4969
  %v5994 = vpack.c.b16 %v4972, %v4971
  %v5995 = vpack.c.b16 %v4974, %v4973
  %v5996 = vpack.c.b16 %v4976, %v4975
  %v5997 = vpack.c.b16 %v4978, %v4977
  %v5998 = vpack.c.b16 %v4980, %v4979
  %v5999 = vpack.c.b16 %v4982, %v4981
  %v6000 = vpack.c.b16 %v4984, %v4983
  %v6001 = vpack.c.b16 %v4986, %v4985
  %v6002 = vpack.c.b16 %v4988, %v4987
  %v6003 = vpack.c.b16 %v4990, %v4989
  %v6004 = vpack.c.b16 %v4992, %v4991
  %v6005 = vpack.c.b16 %v4994, %v4993
  %v6006 = vpack.c.b16 %v4996, %v4995
  %v6007 = vpack.c.b16 %v4998, %v4997
  %v6008 = vpack.c.b16 %v5000, %v4999
  %v6009 = vpack.c.b16 %v5002, %v5001
  %v6010 = vpack.c.b16 %v5004, %v5003
  %v6011 = vpack.c.b16 %v5006, %v5005
  %v6012 = vpack.c.b16 %v5008, %v5007
  %v6013 = vpack.c.b16 %v5010, %v5009
  %v6014 = vpack.c.b16 %v5012, %v5011
  %v6015 = vpack.c.b16 %v5014, %v5013
  %v6016 = vpack.c.b16 %v5016, %v5015
  %v6017 = vpack.c.b16 %v5018, %v5017
  %v6018 = vpack.c.b16 %v5020, %v5019
  %v6019 = vpack.c.b16 %v5022, %v5021
  %v6020 = vpack.c.b16 %v5024, %v5023
  %v6021 = vpack.c.b16 %v5026, %v5025
  %v6022 = vpack.c.b16 %v5028, %v5027
  %v6023 = vpack.c.b16 %v5030, %v5029
  %v6024 = vpack.c.b16 %v5032, %v5031
  %v6025 = vpack.c.b16 %v5034, %v5033
  %v6026 = vpack.c.b16 %v5036, %v5035
  %v6027 = vpack.c.b16 %v5038, %v5037
  %v6028 = vpack.c.b16 %v5040, %v5039
  %v6029 = vpack.c.b16 %v5042, %v5041
  %v6030 = vpack.c.b16 %v5044, %v5043
  %v6031 = vpack.c.b16 %v5046, %v5045
  %v6032 = vpack.c.b16 %v5048, %v5047
  %v6033 = vpack.c.b16 %v5050, %v5049
  %v6034 = vpack.c.b16 %v5052, %v5051
  %v6035 = vpack.c.b16 %v5054, %v5053
  %v6036 = vpack.c.b16 %v5056, %v5055
  %v6037 = vpack.c.b16 %v5058, %v5057
  %v6038 = vpack.c.b16 %v5060, %v5059
  %v6039 = vpack.c.b16 %v5062, %v5061
  %v6040 = vpack.c.b16 %v5064, %v5063
  %v6041 = vpack.c.b16 %v5066, %v5065
  %v6042 = vpack.c.b16 %v5068, %v5067
  %v6043 = vpack.c.b16 %v5070, %v5069
  %v6044 = vpack.c.b16 %v5072, %v5071
  %v6045 = vpack.c.b16 %v5074, %v5073
  %v6046 = vpack.c.b16 %v5076, %v5075
  %v6047 = vpack.c.b16 %v5078, %v5077
  %v6048 = vpack.c.b16 %v5080, %v5079
  %v6049 = vpack.c.b16 %v5082, %v5081
  %v6050 = vpack.c.b16 %v5084, %v5083
  %v6051 = vpack.c.b16 %v5086, %v5085
  %v6052 = vpack.c.b16 %v5088, %v5087
  %v6053 = vpack.c.b16 %v5090, %v5089
  %v6054 = vpack.c.b16 %v5092, %v5091
  %v6055 = vpack.c.b16 %v5094, %v5093
  %v6056 = vpack.c.b16 %v5096, %v5095
  %v6057 = vpack.c.b16 %v5098, %v5097
  %v6058 = vpack.c.b16 %v5100, %v5099
  %v6059 = vpack.c.b16 %v5102, %v5101
  %v6060 = vpack.c.b16 %v5104, %v5103
  %v6061 = vpack.c.b16 %v5106, %v5105
  %v6062 = vpack.c.b16 %v5108, %v5107
  %v6063 = vpack.c.b16 %v5110, %v5109
  %v6064 = vpack.c.b16 %v5112, %v5111
  %v6065 = vpack.c.b16 %v5114, %v5113
  %v6066 = vpack.c.b16 %v5116, %v5115
  %v6067 = vpack.c.b16 %v5118, %v5117
  %v6068 = vpack.c.b16 %v5120, %v5119
  %v6069 = vpack.c.b16 %v5122, %v5121
  %v6070 = vpack.c.b16 %v5124, %v5123
  %v6071 = vpack.c.b16 %v5126, %v5125
  %v6072 = vpack.c.b16 %v5128, %v5127
  %v6073 = vpack.c.b16 %v5130, %v5129
  %v6074 = vpack.c.b16 %v5132, %v5131
  %v6075 = vpack.c.b16 %v5134, %v5133
  %v6076 = vpack.c.b16 %v5136, %v5135
  %v6077 = vpack.c.b16 %v5138, %v5137
  %v6078 = vpack.c.b16 %v5140, %v5139
  %v6079 = vpack.c.b16 %v5142, %v5141
  %v6080 = vpack.c.b16 %v5144, %v5143
  %v6081 = vpack.c.b16 %v5146, %v5145
  %v6082 = vpack.c.b16 %v5148, %v5147
  %v6083 = vpack.c.b16 %v5150, %v5149
  %v6084 = vpack.c.b16 %v5152, %v5151
  %v6085 = vpack.c.b16 %v5154, %v5153
  %v6086 = vpack.c.b16 %v5156, %v5155
  %v6087 = vpack.c.b16 %v5158, %v5157
  %v6088 = vpack.c.b16 %v5160, %v5159
  %v6089 = vpack.c.b16 %v5162, %v5161
  %v6090 = vpack.c.b16 %v5164, %v5163
  %v6091 = vpack.c.b16 %v5166, %v5165
  %v6092 = vpack.c.b16 %v5168, %v5167
  %v6093 = vpack.c.b16 %v5170, %v5169
  %v6094 = vpack.c.b16 %v5172, %v5171
  %v6095 = vpack.c.b16 %v5174, %v5173
  %v6096 = vpack.c.b16 %v5176, %v5175
  %v6097 = vpack.c.b16 %v5178, %v5177
  %v6098 = vpack.c.b16 %v5180, %v5179
  %v6099 = vpack.c.b16 %v5182, %v5181
  %v6100 = vpack.c.b16 %v5184, %v5183
  %v6101 = vpack.c.b16 %v5186, %v5185
  %v6102 = vpack.c.b16 %v5188, %v5187
  %v6103 = vpack.c.b16 %v5190, %v5189
  %v6104 = vpack.c.b16 %v5192, %v5191
  %v6105 = vpack.c.b16 %v5194, %v5193
  %v6106 = vpack.c.b16 %v5196, %v5195
  %v6107 = vpack.c.b16 %v5198, %v5197
  %v6108 = vpack.c.b16 %v5200, %v5199
  %v6109 = vpack.c.b16 %v5202, %v5201
  %v6110 = vpack.c.b16 %v5204, %v5203
  %v6111 = vpack.c.b16 %v5206, %v5205
  %v6112 = vpack.c.b16 %v5208, %v5207
  %v6113 = vpack.c.b16 %v5210, %v5209
  %v6114 = vpack.c.b16 %v5212, %v5211
  %v6115 = vpack.c.b16 %v5214, %v5213
  %v6116 = vpack.c.b16 %v5216, %v5215
  %v6117 = vpack.c.b16 %v5218, %v5217
  %v6118 = vpack.c.b16 %v5220, %v5219
  %v6119 = vpack.c.b16 %v5222, %v5221
  %v6120 = vpack.c.b16 %v5224, %v5223
  %v6121 = vpack.c.b16 %v5226, %v5225
  %v6122 = vpack.c.b16 %v5228, %v5227
  %v6123 = vpack.c.b16 %v5230, %v5229
  %v6124 = vpack.c.b16 %v5232, %v5231
  %v6125 = vpack.c.b16 %v5234, %v5233
  %v6126 = vpack.c.b16 %v5236, %v5235
  %v6127 = vpack.c.b16 %v5238, %v5237
  %v6128 = vpack.c.b16 %v5240, %v5239
  %v6129 = vpack.c.b16 %v5242, %v5241
  %v6130 = vpack.c.b16 %v5244, %v5243
  %v6131 = vpack.c.b16 %v5246, %v5245
  %v6132 = vpack.c.b16 %v5248, %v5247
  %v6133 = vpack.c.b16 %v5250, %v5249
  %v6134 = vpack.c.b16 %v5252, %v5251
  %v6135 = vpack.c.b16 %v5254, %v5253
  %v6136 = vpack.c.b16 %v5256, %v5255
  %v6137 = vpack.c.b16 %v5258, %v5257
  %v6138 = vpack.c.b16 %v5260, %v5259
  %v6139 = vpack.c.b16 %v5262, %v5261
  %v6140 = vpack.c.b16 %v5264, %v5263
  %v6141 = vpack.c.b16 %v5266, %v5265
  %v6142 = vpack.c.b16 %v5268, %v5267
  %v6143 = vpack.c.b16 %v5270, %v5269
  %v6144 = vpack.c.b16 %v5272, %v5271
  %v6145 = vpack.c.b16 %v5274, %v5273
  %v6146 = vpack.c.b16 %v5276, %v5275
  %v6147 = vpack.c.b16 %v5278, %v5277
  %v6148 = vpack.c.b16 %v5280, %v5279
  %v6149 = vpack.c.b16 %v5282, %v5281
  %v6150 = vpack.c.b16 %v5284, %v5283
  %v6151 = vpack.c.b16 %v5286, %v5285
  %v6152 = vpack.c.b16 %v5288, %v5287
  %v6153 = vpack.c.b16 %v5290, %v5289
  %v6154 = vpack.c.b16 %v5292, %v5291
  %v6155 = vpack.c.b16 %v5294, %v5293
  %v6156 = vpack.c.b16 %v5296, %v5295
  %v6157 = vpack.c.b16 %v5298, %v5297
  %v6158 = vpack.c.b16 %v5300, %v5299
  %v6159 = vpack.c.b16 %v5302, %v5301
  %v6160 = vpack.c.b16 %v5304, %v5303
  %v6161 = vpack.c.b16 %v5306, %v5305
  %v6162 = vpack.c.b16 %v5308, %v5307
  %v6163 = vpack.c.b16 %v5310, %v5309
  %v6164 = vpack.c.b16 %v5312, %v5311
  %v6165 = vpack.c.b16 %v5314, %v5313
  %v6166 = vpack.c.b16 %v5316, %v5315
  %v6167 = vpack.c.b16 %v5318, %v5317
  %v6168 = vpack.c.b16 %v5320, %v5319
  %v6169 = vpack.c.b16 %v5322, %v5321
  %v6170 = vpack.c.b16 %v5324, %v5323
  %v6171 = vpack.c.b16 %v5326, %v5325
  %v6172 = vpack.c.b16 %v5328, %v5327
  %v6173 = vpack.c.b16 %v5330, %v5329
  %v6174 = vpack.c.b16 %v5332, %v5331
  %v6175 = vpack.c.b16 %v5334, %v5333
  %v6176 = vpack.c.b16 %v5336, %v5335
  %v6177 = vpack.c.b16 %v5338, %v5337
  %v6178 = vpack.c.b16 %v5340, %v5339
  %v6179 = vpack.c.b16 %v5342, %v5341
  %v6180 = vpack.c.b16 %v5344, %v5343
  %v6181 = vpack.c.b16 %v5346, %v5345
  %v6182 = vpack.c.b16 %v5348, %v5347
  %v6183 = vpack.c.b16 %v5350, %v5349
  %v6184 = vpack.c.b16 %v5352, %v5351
  %v6185 = vpack.c.b16 %v5354, %v5353
  %v6186 = vpack.c.b16 %v5356, %v5355
  %v6187 = vpack.c.b16 %v5358, %v5357
  %v6188 = vpack.c.b16 %v5360, %v5359
  %v6189 = vpack.c.b16 %v5362, %v5361
  %v6190 = vpack.c.b16 %v5364, %v5363
  %v6191 = vpack.c.b16 %v5366, %v5365
  %v6192 = vpack.c.b16 %v5368, %v5367
  %v6193 = vpack.c.b16 %v5370, %v5369
  %v6194 = vpack.c.b16 %v5372, %v5371
  %v6195 = vpack.c.b16 %v5374, %v5373
  %v6196 = vpack.c.b16 %v5376, %v5375
  %v6197 = vpack.c.b16 %v5378, %v5377
  %v6198 = vpack.c.b16 %v5380, %v5379
  %v6199 = vpack.c.b16 %v5382, %v5381
  %v6200 = vpack.c.b16 %v5384, %v5383
  %v6201 = vpack.c.b16 %v5386, %v5385
  %v6202 = vpack.c.b16 %v5388, %v5387
  %v6203 = vpack.c.b16 %v5390, %v5389
  %v6204 = vpack.c.b16 %v5392, %v5391
  %v6205 = vpack.c.b16 %v5394, %v5393
  %v6206 = vpack.c.b16 %v5396, %v5395
  %v6207 = vpack.c.b16 %v5398, %v5397
  %v6208 = vpack.c.b16 %v5400, %v5399
  %v6209 = vpack.c.b16 %v5402, %v5401
  %v6210 = vpack.c.b16 %v5404, %v5403
  %v6211 = vpack.c.b16 %v5406, %v5405
  %v6212 = vpack.c.b16 %v5408, %v5407
  %v6213 = vpack.c.b16 %v5410, %v5409
  %v6214 = vpack.c.b16 %v5412, %v5411
  %v6215 = vpack.c.b16 %v5414, %v5413
  %v6216 = vpack.c.b16 %v5416, %v5415
  %7017 = vmatpush.bf16.msra.mxu0 %v5424
  %7018 = vmatpush.bf16.msra.mxu0 %v5423
  %7019 = vmatpush.bf16.msra.mxu0 %v5422
  %7020 = vmatpush.bf16.msra.mxu0 %v5421
  %7021 = vmatpush.bf16.msra.mxu0 %v5420
  %7022 = vmatpush.bf16.msra.mxu0 %v5419
  %7023 = vmatpush.bf16.msra.mxu0 %v5418
  %7024 = vmatpush.bf16.msra.mxu0 %v5417
  %7025 = vmatmul.bf16.gmra.mxu0 %v2017
  %v7026 = vpop.f32.mrf.mxu0
  %v7027 = vadd.f32 0.0, %v7026
  %v7028 = vpop.f32.mrf.mxu0
  %v7029 = vadd.f32 0.0, %v7028
  %7030 = vdwg.mxu0
  %7031 = vmatpush.bf16.msra.mxu0 %v5432
  %7032 = vmatpush.bf16.msra.mxu0 %v5431
  %7033 = vmatpush.bf16.msra.mxu0 %v5430
  %7034 = vmatpush.bf16.msra.mxu0 %v5429
  %7035 = vmatpush.bf16.msra.mxu0 %v5428
  %7036 = vmatpush.bf16.msra.mxu0 %v5427
  %7037 = vmatpush.bf16.msra.mxu0 %v5426
  %7038 = vmatpush.bf16.msra.mxu0 %v5425
  %7039 = vmatmul.bf16.gmra.mxu0 %v2018
  %v7040 = vpop.f32.mrf.mxu0
  %v7041 = vadd.f32 %v7027, %v7040
  %v7042 = vpop.f32.mrf.mxu0
  %v7043 = vadd.f32 %v7029, %v7042
  %7044 = vdwg.mxu0
  %7045 = vmatpush.bf16.msra.mxu0 %v5440
  %7046 = vmatpush.bf16.msra.mxu0 %v5439
  %7047 = vmatpush.bf16.msra.mxu0 %v5438
  %7048 = vmatpush.bf16.msra.mxu0 %v5437
  %7049 = vmatpush.bf16.msra.mxu0 %v5436
  %7050 = vmatpush.bf16.msra.mxu0 %v5435
  %7051 = vmatpush.bf16.msra.mxu0 %v5434
  %7052 = vmatpush.bf16.msra.mxu0 %v5433
  %7053 = vmatmul.bf16.gmra.mxu0 %v2019
  %v7054 = vpop.f32.mrf.mxu0
  %v7055 = vadd.f32 %v7041, %v7054
  %v7056 = vpop.f32.mrf.mxu0
  %v7057 = vadd.f32 %v7043, %v7056
  %7058 = vdwg.mxu0
  %7059 = vmatpush.bf16.msra.mxu0 %v5448
  %7060 = vmatpush.bf16.msra.mxu0 %v5447
  %7061 = vmatpush.bf16.msra.mxu0 %v5446
  %7062 = vmatpush.bf16.msra.mxu0 %v5445
  %7063 = vmatpush.bf16.msra.mxu0 %v5444
  %7064 = vmatpush.bf16.msra.mxu0 %v5443
  %7065 = vmatpush.bf16.msra.mxu0 %v5442
  %7066 = vmatpush.bf16.msra.mxu0 %v5441
  %7067 = vmatmul.bf16.gmra.mxu0 %v2020
  %v7068 = vpop.f32.mrf.mxu0
  %v7069 = vadd.f32 %v7055, %v7068
  %v7070 = vpop.f32.mrf.mxu0
  %v7071 = vadd.f32 %v7057, %v7070
  %7072 = vdwg.mxu0
  %7073 = vmatpush.bf16.msra.mxu0 %v5456
  %7074 = vmatpush.bf16.msra.mxu0 %v5455
  %7075 = vmatpush.bf16.msra.mxu0 %v5454
  %7076 = vmatpush.bf16.msra.mxu0 %v5453
  %7077 = vmatpush.bf16.msra.mxu0 %v5452
  %7078 = vmatpush.bf16.msra.mxu0 %v5451
  %7079 = vmatpush.bf16.msra.mxu0 %v5450
  %7080 = vmatpush.bf16.msra.mxu0 %v5449
  %7081 = vmatmul.bf16.gmra.mxu0 %v2021
  %v7082 = vpop.f32.mrf.mxu0
  %v7083 = vadd.f32 %v7069, %v7082
  %v7084 = vpop.f32.mrf.mxu0
  %v7085 = vadd.f32 %v7071, %v7084
  %7086 = vdwg.mxu0
  %7087 = vmatpush.bf16.msra.mxu0 %v5464
  %7088 = vmatpush.bf16.msra.mxu0 %v5463
  %7089 = vmatpush.bf16.msra.mxu0 %v5462
  %7090 = vmatpush.bf16.msra.mxu0 %v5461
  %7091 = vmatpush.bf16.msra.mxu0 %v5460
  %7092 = vmatpush.bf16.msra.mxu0 %v5459
  %7093 = vmatpush.bf16.msra.mxu0 %v5458
  %7094 = vmatpush.bf16.msra.mxu0 %v5457
  %7095 = vmatmul.bf16.gmra.mxu0 %v2022
  %v7096 = vpop.f32.mrf.mxu0
  %v7097 = vadd.f32 %v7083, %v7096
  %v7098 = vpop.f32.mrf.mxu0
  %v7099 = vadd.f32 %v7085, %v7098
  %7100 = vdwg.mxu0
  %7101 = vmatpush.bf16.msra.mxu0 %v5472
  %7102 = vmatpush.bf16.msra.mxu0 %v5471
  %7103 = vmatpush.bf16.msra.mxu0 %v5470
  %7104 = vmatpush.bf16.msra.mxu0 %v5469
  %7105 = vmatpush.bf16.msra.mxu0 %v5468
  %7106 = vmatpush.bf16.msra.mxu0 %v5467
  %7107 = vmatpush.bf16.msra.mxu0 %v5466
  %7108 = vmatpush.bf16.msra.mxu0 %v5465
  %7109 = vmatmul.bf16.gmra.mxu0 %v2023
  %v7110 = vpop.f32.mrf.mxu0
  %v7111 = vadd.f32 %v7097, %v7110
  %v7112 = vpop.f32.mrf.mxu0
  %v7113 = vadd.f32 %v7099, %v7112
  %7114 = vdwg.mxu0
  %7115 = vmatpush.bf16.msra.mxu0 %v5480
  %7116 = vmatpush.bf16.msra.mxu0 %v5479
  %7117 = vmatpush.bf16.msra.mxu0 %v5478
  %7118 = vmatpush.bf16.msra.mxu0 %v5477
  %7119 = vmatpush.bf16.msra.mxu0 %v5476
  %7120 = vmatpush.bf16.msra.mxu0 %v5475
  %7121 = vmatpush.bf16.msra.mxu0 %v5474
  %7122 = vmatpush.bf16.msra.mxu0 %v5473
  %7123 = vmatmul.bf16.gmra.mxu0 %v2024
  %v7124 = vpop.f32.mrf.mxu0
  %v7125 = vadd.f32 %v7111, %v7124
  %v7126 = vpop.f32.mrf.mxu0
  %v7127 = vadd.f32 %v7113, %v7126
  %7128 = vdwg.mxu0
  %7129 = vmatpush.bf16.msra.mxu0 %v5488
  %7130 = vmatpush.bf16.msra.mxu0 %v5487
  %7131 = vmatpush.bf16.msra.mxu0 %v5486
  %7132 = vmatpush.bf16.msra.mxu0 %v5485
  %7133 = vmatpush.bf16.msra.mxu0 %v5484
  %7134 = vmatpush.bf16.msra.mxu0 %v5483
  %7135 = vmatpush.bf16.msra.mxu0 %v5482
  %7136 = vmatpush.bf16.msra.mxu0 %v5481
  %7137 = vmatmul.bf16.gmra.mxu0 %v2025
  %v7138 = vpop.f32.mrf.mxu0
  %v7139 = vadd.f32 %v7125, %v7138
  %v7140 = vpop.f32.mrf.mxu0
  %v7141 = vadd.f32 %v7127, %v7140
  %7142 = vdwg.mxu0
  %7143 = vmatpush.bf16.msra.mxu0 %v5496
  %7144 = vmatpush.bf16.msra.mxu0 %v5495
  %7145 = vmatpush.bf16.msra.mxu0 %v5494
  %7146 = vmatpush.bf16.msra.mxu0 %v5493
  %7147 = vmatpush.bf16.msra.mxu0 %v5492
  %7148 = vmatpush.bf16.msra.mxu0 %v5491
  %7149 = vmatpush.bf16.msra.mxu0 %v5490
  %7150 = vmatpush.bf16.msra.mxu0 %v5489
  %7151 = vmatmul.bf16.gmra.mxu0 %v2026
  %v7152 = vpop.f32.mrf.mxu0
  %v7153 = vadd.f32 %v7139, %v7152
  %v7154 = vpop.f32.mrf.mxu0
  %v7155 = vadd.f32 %v7141, %v7154
  %7156 = vdwg.mxu0
  %7157 = vmatpush.bf16.msra.mxu0 %v5504
  %7158 = vmatpush.bf16.msra.mxu0 %v5503
  %7159 = vmatpush.bf16.msra.mxu0 %v5502
  %7160 = vmatpush.bf16.msra.mxu0 %v5501
  %7161 = vmatpush.bf16.msra.mxu0 %v5500
  %7162 = vmatpush.bf16.msra.mxu0 %v5499
  %7163 = vmatpush.bf16.msra.mxu0 %v5498
  %7164 = vmatpush.bf16.msra.mxu0 %v5497
  %7165 = vmatmul.bf16.gmra.mxu0 %v2027
  %v7166 = vpop.f32.mrf.mxu0
  %v7167 = vadd.f32 %v7153, %v7166
  %v7168 = vpop.f32.mrf.mxu0
  %v7169 = vadd.f32 %v7155, %v7168
  %7170 = vdwg.mxu0
  %7171 = vmatpush.bf16.msra.mxu0 %v5512
  %7172 = vmatpush.bf16.msra.mxu0 %v5511
  %7173 = vmatpush.bf16.msra.mxu0 %v5510
  %7174 = vmatpush.bf16.msra.mxu0 %v5509
  %7175 = vmatpush.bf16.msra.mxu0 %v5508
  %7176 = vmatpush.bf16.msra.mxu0 %v5507
  %7177 = vmatpush.bf16.msra.mxu0 %v5506
  %7178 = vmatpush.bf16.msra.mxu0 %v5505
  %7179 = vmatmul.bf16.gmra.mxu0 %v2028
  %v7180 = vpop.f32.mrf.mxu0
  %v7181 = vadd.f32 %v7167, %v7180
  %v7182 = vpop.f32.mrf.mxu0
  %v7183 = vadd.f32 %v7169, %v7182
  %7184 = vdwg.mxu0
  %7185 = vmatpush.bf16.msra.mxu0 %v5520
  %7186 = vmatpush.bf16.msra.mxu0 %v5519
  %7187 = vmatpush.bf16.msra.mxu0 %v5518
  %7188 = vmatpush.bf16.msra.mxu0 %v5517
  %7189 = vmatpush.bf16.msra.mxu0 %v5516
  %7190 = vmatpush.bf16.msra.mxu0 %v5515
  %7191 = vmatpush.bf16.msra.mxu0 %v5514
  %7192 = vmatpush.bf16.msra.mxu0 %v5513
  %7193 = vmatmul.bf16.gmra.mxu0 %v2029
  %v7194 = vpop.f32.mrf.mxu0
  %v7195 = vadd.f32 %v7181, %v7194
  %v7196 = vpop.f32.mrf.mxu0
  %v7197 = vadd.f32 %v7183, %v7196
  %7198 = vdwg.mxu0
  %7199 = vmatpush.bf16.msra.mxu0 %v5528
  %7200 = vmatpush.bf16.msra.mxu0 %v5527
  %7201 = vmatpush.bf16.msra.mxu0 %v5526
  %7202 = vmatpush.bf16.msra.mxu0 %v5525
  %7203 = vmatpush.bf16.msra.mxu0 %v5524
  %7204 = vmatpush.bf16.msra.mxu0 %v5523
  %7205 = vmatpush.bf16.msra.mxu0 %v5522
  %7206 = vmatpush.bf16.msra.mxu0 %v5521
  %7207 = vmatmul.bf16.gmra.mxu0 %v2030
  %v7208 = vpop.f32.mrf.mxu0
  %v7209 = vadd.f32 %v7195, %v7208
  %v7210 = vpop.f32.mrf.mxu0
  %v7211 = vadd.f32 %v7197, %v7210
  %7212 = vdwg.mxu0
  %7213 = vmatpush.bf16.msra.mxu0 %v5536
  %7214 = vmatpush.bf16.msra.mxu0 %v5535
  %7215 = vmatpush.bf16.msra.mxu0 %v5534
  %7216 = vmatpush.bf16.msra.mxu0 %v5533
  %7217 = vmatpush.bf16.msra.mxu0 %v5532
  %7218 = vmatpush.bf16.msra.mxu0 %v5531
  %7219 = vmatpush.bf16.msra.mxu0 %v5530
  %7220 = vmatpush.bf16.msra.mxu0 %v5529
  %7221 = vmatmul.bf16.gmra.mxu0 %v2031
  %v7222 = vpop.f32.mrf.mxu0
  %v7223 = vadd.f32 %v7209, %v7222
  %v7224 = vpop.f32.mrf.mxu0
  %v7225 = vadd.f32 %v7211, %v7224
  %7226 = vdwg.mxu0
  %7227 = vmatpush.bf16.msra.mxu0 %v5544
  %7228 = vmatpush.bf16.msra.mxu0 %v5543
  %7229 = vmatpush.bf16.msra.mxu0 %v5542
  %7230 = vmatpush.bf16.msra.mxu0 %v5541
  %7231 = vmatpush.bf16.msra.mxu0 %v5540
  %7232 = vmatpush.bf16.msra.mxu0 %v5539
  %7233 = vmatpush.bf16.msra.mxu0 %v5538
  %7234 = vmatpush.bf16.msra.mxu0 %v5537
  %7235 = vmatmul.bf16.gmra.mxu0 %v2032
  %v7236 = vpop.f32.mrf.mxu0
  %v7237 = vadd.f32 %v7223, %v7236
  %v7238 = vpop.f32.mrf.mxu0
  %v7239 = vadd.f32 %v7225, %v7238
  %7240 = vdwg.mxu0
  %7241 = vmatpush.bf16.msra.mxu0 %v5552
  %7242 = vmatpush.bf16.msra.mxu0 %v5551
  %7243 = vmatpush.bf16.msra.mxu0 %v5550
  %7244 = vmatpush.bf16.msra.mxu0 %v5549
  %7245 = vmatpush.bf16.msra.mxu0 %v5548
  %7246 = vmatpush.bf16.msra.mxu0 %v5547
  %7247 = vmatpush.bf16.msra.mxu0 %v5546
  %7248 = vmatpush.bf16.msra.mxu0 %v5545
  %7249 = vmatmul.bf16.gmra.mxu0 %v2033
  %v7250 = vpop.f32.mrf.mxu0
  %v7251 = vadd.f32 %v7237, %v7250
  %v7252 = vpop.f32.mrf.mxu0
  %v7253 = vadd.f32 %v7239, %v7252
  %7254 = vdwg.mxu0
  %7255 = vmatpush.bf16.msra.mxu0 %v5560
  %7256 = vmatpush.bf16.msra.mxu0 %v5559
  %7257 = vmatpush.bf16.msra.mxu0 %v5558
  %7258 = vmatpush.bf16.msra.mxu0 %v5557
  %7259 = vmatpush.bf16.msra.mxu0 %v5556
  %7260 = vmatpush.bf16.msra.mxu0 %v5555
  %7261 = vmatpush.bf16.msra.mxu0 %v5554
  %7262 = vmatpush.bf16.msra.mxu0 %v5553
  %7263 = vmatmul.bf16.gmra.mxu0 %v2034
  %v7264 = vpop.f32.mrf.mxu0
  %v7265 = vadd.f32 %v7251, %v7264
  %v7266 = vpop.f32.mrf.mxu0
  %v7267 = vadd.f32 %v7253, %v7266
  %7268 = vdwg.mxu0
  %7269 = vmatpush.bf16.msra.mxu0 %v5568
  %7270 = vmatpush.bf16.msra.mxu0 %v5567
  %7271 = vmatpush.bf16.msra.mxu0 %v5566
  %7272 = vmatpush.bf16.msra.mxu0 %v5565
  %7273 = vmatpush.bf16.msra.mxu0 %v5564
  %7274 = vmatpush.bf16.msra.mxu0 %v5563
  %7275 = vmatpush.bf16.msra.mxu0 %v5562
  %7276 = vmatpush.bf16.msra.mxu0 %v5561
  %7277 = vmatmul.bf16.gmra.mxu0 %v2035
  %v7278 = vpop.f32.mrf.mxu0
  %v7279 = vadd.f32 %v7265, %v7278
  %v7280 = vpop.f32.mrf.mxu0
  %v7281 = vadd.f32 %v7267, %v7280
  %7282 = vdwg.mxu0
  %7283 = vmatpush.bf16.msra.mxu0 %v5576
  %7284 = vmatpush.bf16.msra.mxu0 %v5575
  %7285 = vmatpush.bf16.msra.mxu0 %v5574
  %7286 = vmatpush.bf16.msra.mxu0 %v5573
  %7287 = vmatpush.bf16.msra.mxu0 %v5572
  %7288 = vmatpush.bf16.msra.mxu0 %v5571
  %7289 = vmatpush.bf16.msra.mxu0 %v5570
  %7290 = vmatpush.bf16.msra.mxu0 %v5569
  %7291 = vmatmul.bf16.gmra.mxu0 %v2036
  %v7292 = vpop.f32.mrf.mxu0
  %v7293 = vadd.f32 %v7279, %v7292
  %v7294 = vpop.f32.mrf.mxu0
  %v7295 = vadd.f32 %v7281, %v7294
  %7296 = vdwg.mxu0
  %7297 = vmatpush.bf16.msra.mxu0 %v5584
  %7298 = vmatpush.bf16.msra.mxu0 %v5583
  %7299 = vmatpush.bf16.msra.mxu0 %v5582
  %7300 = vmatpush.bf16.msra.mxu0 %v5581
  %7301 = vmatpush.bf16.msra.mxu0 %v5580
  %7302 = vmatpush.bf16.msra.mxu0 %v5579
  %7303 = vmatpush.bf16.msra.mxu0 %v5578
  %7304 = vmatpush.bf16.msra.mxu0 %v5577
  %7305 = vmatmul.bf16.gmra.mxu0 %v2037
  %v7306 = vpop.f32.mrf.mxu0
  %v7307 = vadd.f32 %v7293, %v7306
  %v7308 = vpop.f32.mrf.mxu0
  %v7309 = vadd.f32 %v7295, %v7308
  %7310 = vdwg.mxu0
  %7311 = vmatpush.bf16.msra.mxu0 %v5592
  %7312 = vmatpush.bf16.msra.mxu0 %v5591
  %7313 = vmatpush.bf16.msra.mxu0 %v5590
  %7314 = vmatpush.bf16.msra.mxu0 %v5589
  %7315 = vmatpush.bf16.msra.mxu0 %v5588
  %7316 = vmatpush.bf16.msra.mxu0 %v5587
  %7317 = vmatpush.bf16.msra.mxu0 %v5586
  %7318 = vmatpush.bf16.msra.mxu0 %v5585
  %7319 = vmatmul.bf16.gmra.mxu0 %v2038
  %v7320 = vpop.f32.mrf.mxu0
  %v7321 = vadd.f32 %v7307, %v7320
  %v7322 = vpop.f32.mrf.mxu0
  %v7323 = vadd.f32 %v7309, %v7322
  %7324 = vdwg.mxu0
  %7325 = vmatpush.bf16.msra.mxu0 %v5600
  %7326 = vmatpush.bf16.msra.mxu0 %v5599
  %7327 = vmatpush.bf16.msra.mxu0 %v5598
  %7328 = vmatpush.bf16.msra.mxu0 %v5597
  %7329 = vmatpush.bf16.msra.mxu0 %v5596
  %7330 = vmatpush.bf16.msra.mxu0 %v5595
  %7331 = vmatpush.bf16.msra.mxu0 %v5594
  %7332 = vmatpush.bf16.msra.mxu0 %v5593
  %7333 = vmatmul.bf16.gmra.mxu0 %v2039
  %v7334 = vpop.f32.mrf.mxu0
  %v7335 = vadd.f32 %v7321, %v7334
  %v7336 = vpop.f32.mrf.mxu0
  %v7337 = vadd.f32 %v7323, %v7336
  %7338 = vdwg.mxu0
  %7339 = vmatpush.bf16.msra.mxu0 %v5608
  %7340 = vmatpush.bf16.msra.mxu0 %v5607
  %7341 = vmatpush.bf16.msra.mxu0 %v5606
  %7342 = vmatpush.bf16.msra.mxu0 %v5605
  %7343 = vmatpush.bf16.msra.mxu0 %v5604
  %7344 = vmatpush.bf16.msra.mxu0 %v5603
  %7345 = vmatpush.bf16.msra.mxu0 %v5602
  %7346 = vmatpush.bf16.msra.mxu0 %v5601
  %7347 = vmatmul.bf16.gmra.mxu0 %v2040
  %v7348 = vpop.f32.mrf.mxu0
  %v7349 = vadd.f32 %v7335, %v7348
  %v7350 = vpop.f32.mrf.mxu0
  %v7351 = vadd.f32 %v7337, %v7350
  %7352 = vdwg.mxu0
  %7353 = vmatpush.bf16.msra.mxu0 %v5616
  %7354 = vmatpush.bf16.msra.mxu0 %v5615
  %7355 = vmatpush.bf16.msra.mxu0 %v5614
  %7356 = vmatpush.bf16.msra.mxu0 %v5613
  %7357 = vmatpush.bf16.msra.mxu0 %v5612
  %7358 = vmatpush.bf16.msra.mxu0 %v5611
  %7359 = vmatpush.bf16.msra.mxu0 %v5610
  %7360 = vmatpush.bf16.msra.mxu0 %v5609
  %7361 = vmatmul.bf16.gmra.mxu0 %v2041
  %v7362 = vpop.f32.mrf.mxu0
  %v7363 = vadd.f32 %v7349, %v7362
  %v7364 = vpop.f32.mrf.mxu0
  %v7365 = vadd.f32 %v7351, %v7364
  %7366 = vdwg.mxu0
  %7367 = vmatpush.bf16.msra.mxu0 %v5624
  %7368 = vmatpush.bf16.msra.mxu0 %v5623
  %7369 = vmatpush.bf16.msra.mxu0 %v5622
  %7370 = vmatpush.bf16.msra.mxu0 %v5621
  %7371 = vmatpush.bf16.msra.mxu0 %v5620
  %7372 = vmatpush.bf16.msra.mxu0 %v5619
  %7373 = vmatpush.bf16.msra.mxu0 %v5618
  %7374 = vmatpush.bf16.msra.mxu0 %v5617
  %7375 = vmatmul.bf16.gmra.mxu0 %v2042
  %v7376 = vpop.f32.mrf.mxu0
  %v7377 = vadd.f32 %v7363, %v7376
  %v7378 = vpop.f32.mrf.mxu0
  %v7379 = vadd.f32 %v7365, %v7378
  %7380 = vdwg.mxu0
  %7381 = vmatpush.bf16.msra.mxu0 %v5632
  %7382 = vmatpush.bf16.msra.mxu0 %v5631
  %7383 = vmatpush.bf16.msra.mxu0 %v5630
  %7384 = vmatpush.bf16.msra.mxu0 %v5629
  %7385 = vmatpush.bf16.msra.mxu0 %v5628
  %7386 = vmatpush.bf16.msra.mxu0 %v5627
  %7387 = vmatpush.bf16.msra.mxu0 %v5626
  %7388 = vmatpush.bf16.msra.mxu0 %v5625
  %7389 = vmatmul.bf16.gmra.mxu0 %v2043
  %v7390 = vpop.f32.mrf.mxu0
  %v7391 = vadd.f32 %v7377, %v7390
  %v7392 = vpop.f32.mrf.mxu0
  %v7393 = vadd.f32 %v7379, %v7392
  %7394 = vdwg.mxu0
  %7395 = vmatpush.bf16.msra.mxu0 %v5640
  %7396 = vmatpush.bf16.msra.mxu0 %v5639
  %7397 = vmatpush.bf16.msra.mxu0 %v5638
  %7398 = vmatpush.bf16.msra.mxu0 %v5637
  %7399 = vmatpush.bf16.msra.mxu0 %v5636
  %7400 = vmatpush.bf16.msra.mxu0 %v5635
  %7401 = vmatpush.bf16.msra.mxu0 %v5634
  %7402 = vmatpush.bf16.msra.mxu0 %v5633
  %7403 = vmatmul.bf16.gmra.mxu0 %v2044
  %v7404 = vpop.f32.mrf.mxu0
  %v7405 = vadd.f32 %v7391, %v7404
  %v7406 = vpop.f32.mrf.mxu0
  %v7407 = vadd.f32 %v7393, %v7406
  %7408 = vdwg.mxu0
  %7409 = vmatpush.bf16.msra.mxu0 %v5648
  %7410 = vmatpush.bf16.msra.mxu0 %v5647
  %7411 = vmatpush.bf16.msra.mxu0 %v5646
  %7412 = vmatpush.bf16.msra.mxu0 %v5645
  %7413 = vmatpush.bf16.msra.mxu0 %v5644
  %7414 = vmatpush.bf16.msra.mxu0 %v5643
  %7415 = vmatpush.bf16.msra.mxu0 %v5642
  %7416 = vmatpush.bf16.msra.mxu0 %v5641
  %7417 = vmatmul.bf16.gmra.mxu0 %v2045
  %v7418 = vpop.f32.mrf.mxu0
  %v7419 = vadd.f32 %v7405, %v7418
  %v7420 = vpop.f32.mrf.mxu0
  %v7421 = vadd.f32 %v7407, %v7420
  %7422 = vdwg.mxu0
  %7423 = vmatpush.bf16.msra.mxu0 %v5656
  %7424 = vmatpush.bf16.msra.mxu0 %v5655
  %7425 = vmatpush.bf16.msra.mxu0 %v5654
  %7426 = vmatpush.bf16.msra.mxu0 %v5653
  %7427 = vmatpush.bf16.msra.mxu0 %v5652
  %7428 = vmatpush.bf16.msra.mxu0 %v5651
  %7429 = vmatpush.bf16.msra.mxu0 %v5650
  %7430 = vmatpush.bf16.msra.mxu0 %v5649
  %7431 = vmatmul.bf16.gmra.mxu0 %v2046
  %v7432 = vpop.f32.mrf.mxu0
  %v7433 = vadd.f32 %v7419, %v7432
  %v7434 = vpop.f32.mrf.mxu0
  %v7435 = vadd.f32 %v7421, %v7434
  %7436 = vdwg.mxu0
  %7437 = vmatpush.bf16.msra.mxu0 %v5664
  %7438 = vmatpush.bf16.msra.mxu0 %v5663
  %7439 = vmatpush.bf16.msra.mxu0 %v5662
  %7440 = vmatpush.bf16.msra.mxu0 %v5661
  %7441 = vmatpush.bf16.msra.mxu0 %v5660
  %7442 = vmatpush.bf16.msra.mxu0 %v5659
  %7443 = vmatpush.bf16.msra.mxu0 %v5658
  %7444 = vmatpush.bf16.msra.mxu0 %v5657
  %7445 = vmatmul.bf16.gmra.mxu0 %v2047
  %v7446 = vpop.f32.mrf.mxu0
  %v7447 = vadd.f32 %v7433, %v7446
  %v7448 = vpop.f32.mrf.mxu0
  %v7449 = vadd.f32 %v7435, %v7448
  %7450 = vdwg.mxu0
  %7451 = vmatpush.bf16.msra.mxu0 %v5672
  %7452 = vmatpush.bf16.msra.mxu0 %v5671
  %7453 = vmatpush.bf16.msra.mxu0 %v5670
  %7454 = vmatpush.bf16.msra.mxu0 %v5669
  %7455 = vmatpush.bf16.msra.mxu0 %v5668
  %7456 = vmatpush.bf16.msra.mxu0 %v5667
  %7457 = vmatpush.bf16.msra.mxu0 %v5666
  %7458 = vmatpush.bf16.msra.mxu0 %v5665
  %7459 = vmatmul.bf16.gmra.mxu0 %v2048
  %v7460 = vpop.f32.mrf.mxu0
  %v7461 = vadd.f32 %v7447, %v7460
  %v7462 = vpop.f32.mrf.mxu0
  %v7463 = vadd.f32 %v7449, %v7462
  %7464 = vdwg.mxu0
  %7465 = vmatpush.bf16.msra.mxu0 %v5680
  %7466 = vmatpush.bf16.msra.mxu0 %v5679
  %7467 = vmatpush.bf16.msra.mxu0 %v5678
  %7468 = vmatpush.bf16.msra.mxu0 %v5677
  %7469 = vmatpush.bf16.msra.mxu0 %v5676
  %7470 = vmatpush.bf16.msra.mxu0 %v5675
  %7471 = vmatpush.bf16.msra.mxu0 %v5674
  %7472 = vmatpush.bf16.msra.mxu0 %v5673
  %7473 = vmatmul.bf16.gmra.mxu0 %v2049
  %v7474 = vpop.f32.mrf.mxu0
  %v7475 = vadd.f32 %v7461, %v7474
  %v7476 = vpop.f32.mrf.mxu0
  %v7477 = vadd.f32 %v7463, %v7476
  %7478 = vdwg.mxu0
  %7479 = vmatpush.bf16.msra.mxu0 %v5688
  %7480 = vmatpush.bf16.msra.mxu0 %v5687
  %7481 = vmatpush.bf16.msra.mxu0 %v5686
  %7482 = vmatpush.bf16.msra.mxu0 %v5685
  %7483 = vmatpush.bf16.msra.mxu0 %v5684
  %7484 = vmatpush.bf16.msra.mxu0 %v5683
  %7485 = vmatpush.bf16.msra.mxu0 %v5682
  %7486 = vmatpush.bf16.msra.mxu0 %v5681
  %7487 = vmatmul.bf16.gmra.mxu0 %v2050
  %v7488 = vpop.f32.mrf.mxu0
  %v7489 = vadd.f32 %v7475, %v7488
  %v7490 = vpop.f32.mrf.mxu0
  %v7491 = vadd.f32 %v7477, %v7490
  %7492 = vdwg.mxu0
  %7493 = vmatpush.bf16.msra.mxu0 %v5696
  %7494 = vmatpush.bf16.msra.mxu0 %v5695
  %7495 = vmatpush.bf16.msra.mxu0 %v5694
  %7496 = vmatpush.bf16.msra.mxu0 %v5693
  %7497 = vmatpush.bf16.msra.mxu0 %v5692
  %7498 = vmatpush.bf16.msra.mxu0 %v5691
  %7499 = vmatpush.bf16.msra.mxu0 %v5690
  %7500 = vmatpush.bf16.msra.mxu0 %v5689
  %7501 = vmatmul.bf16.gmra.mxu0 %v2051
  %v7502 = vpop.f32.mrf.mxu0
  %v7503 = vadd.f32 %v7489, %v7502
  %v7504 = vpop.f32.mrf.mxu0
  %v7505 = vadd.f32 %v7491, %v7504
  %7506 = vdwg.mxu0
  %7507 = vmatpush.bf16.msra.mxu0 %v5704
  %7508 = vmatpush.bf16.msra.mxu0 %v5703
  %7509 = vmatpush.bf16.msra.mxu0 %v5702
  %7510 = vmatpush.bf16.msra.mxu0 %v5701
  %7511 = vmatpush.bf16.msra.mxu0 %v5700
  %7512 = vmatpush.bf16.msra.mxu0 %v5699
  %7513 = vmatpush.bf16.msra.mxu0 %v5698
  %7514 = vmatpush.bf16.msra.mxu0 %v5697
  %7515 = vmatmul.bf16.gmra.mxu0 %v2052
  %v7516 = vpop.f32.mrf.mxu0
  %v7517 = vadd.f32 %v7503, %v7516
  %v7518 = vpop.f32.mrf.mxu0
  %v7519 = vadd.f32 %v7505, %v7518
  %7520 = vdwg.mxu0
  %7521 = vmatpush.bf16.msra.mxu0 %v5712
  %7522 = vmatpush.bf16.msra.mxu0 %v5711
  %7523 = vmatpush.bf16.msra.mxu0 %v5710
  %7524 = vmatpush.bf16.msra.mxu0 %v5709
  %7525 = vmatpush.bf16.msra.mxu0 %v5708
  %7526 = vmatpush.bf16.msra.mxu0 %v5707
  %7527 = vmatpush.bf16.msra.mxu0 %v5706
  %7528 = vmatpush.bf16.msra.mxu0 %v5705
  %7529 = vmatmul.bf16.gmra.mxu0 %v2053
  %v7530 = vpop.f32.mrf.mxu0
  %v7531 = vadd.f32 %v7517, %v7530
  %v7532 = vpop.f32.mrf.mxu0
  %v7533 = vadd.f32 %v7519, %v7532
  %7534 = vdwg.mxu0
  %7535 = vmatpush.bf16.msra.mxu0 %v5720
  %7536 = vmatpush.bf16.msra.mxu0 %v5719
  %7537 = vmatpush.bf16.msra.mxu0 %v5718
  %7538 = vmatpush.bf16.msra.mxu0 %v5717
  %7539 = vmatpush.bf16.msra.mxu0 %v5716
  %7540 = vmatpush.bf16.msra.mxu0 %v5715
  %7541 = vmatpush.bf16.msra.mxu0 %v5714
  %7542 = vmatpush.bf16.msra.mxu0 %v5713
  %7543 = vmatmul.bf16.gmra.mxu0 %v2054
  %v7544 = vpop.f32.mrf.mxu0
  %v7545 = vadd.f32 %v7531, %v7544
  %v7546 = vpop.f32.mrf.mxu0
  %v7547 = vadd.f32 %v7533, %v7546
  %7548 = vdwg.mxu0
  %7549 = vmatpush.bf16.msra.mxu0 %v5728
  %7550 = vmatpush.bf16.msra.mxu0 %v5727
  %7551 = vmatpush.bf16.msra.mxu0 %v5726
  %7552 = vmatpush.bf16.msra.mxu0 %v5725
  %7553 = vmatpush.bf16.msra.mxu0 %v5724
  %7554 = vmatpush.bf16.msra.mxu0 %v5723
  %7555 = vmatpush.bf16.msra.mxu0 %v5722
  %7556 = vmatpush.bf16.msra.mxu0 %v5721
  %7557 = vmatmul.bf16.gmra.mxu0 %v2055
  %v7558 = vpop.f32.mrf.mxu0
  %v7559 = vadd.f32 %v7545, %v7558
  %v7560 = vpop.f32.mrf.mxu0
  %v7561 = vadd.f32 %v7547, %v7560
  %7562 = vdwg.mxu0
  %7563 = vmatpush.bf16.msra.mxu0 %v5736
  %7564 = vmatpush.bf16.msra.mxu0 %v5735
  %7565 = vmatpush.bf16.msra.mxu0 %v5734
  %7566 = vmatpush.bf16.msra.mxu0 %v5733
  %7567 = vmatpush.bf16.msra.mxu0 %v5732
  %7568 = vmatpush.bf16.msra.mxu0 %v5731
  %7569 = vmatpush.bf16.msra.mxu0 %v5730
  %7570 = vmatpush.bf16.msra.mxu0 %v5729
  %7571 = vmatmul.bf16.gmra.mxu0 %v2056
  %v7572 = vpop.f32.mrf.mxu0
  %v7573 = vadd.f32 %v7559, %v7572
  %v7574 = vpop.f32.mrf.mxu0
  %v7575 = vadd.f32 %v7561, %v7574
  %7576 = vdwg.mxu0
  %7577 = vmatpush.bf16.msra.mxu0 %v5744
  %7578 = vmatpush.bf16.msra.mxu0 %v5743
  %7579 = vmatpush.bf16.msra.mxu0 %v5742
  %7580 = vmatpush.bf16.msra.mxu0 %v5741
  %7581 = vmatpush.bf16.msra.mxu0 %v5740
  %7582 = vmatpush.bf16.msra.mxu0 %v5739
  %7583 = vmatpush.bf16.msra.mxu0 %v5738
  %7584 = vmatpush.bf16.msra.mxu0 %v5737
  %7585 = vmatmul.bf16.gmra.mxu0 %v2057
  %v7586 = vpop.f32.mrf.mxu0
  %v7587 = vadd.f32 %v7573, %v7586
  %v7588 = vpop.f32.mrf.mxu0
  %v7589 = vadd.f32 %v7575, %v7588
  %7590 = vdwg.mxu0
  %7591 = vmatpush.bf16.msra.mxu0 %v5752
  %7592 = vmatpush.bf16.msra.mxu0 %v5751
  %7593 = vmatpush.bf16.msra.mxu0 %v5750
  %7594 = vmatpush.bf16.msra.mxu0 %v5749
  %7595 = vmatpush.bf16.msra.mxu0 %v5748
  %7596 = vmatpush.bf16.msra.mxu0 %v5747
  %7597 = vmatpush.bf16.msra.mxu0 %v5746
  %7598 = vmatpush.bf16.msra.mxu0 %v5745
  %7599 = vmatmul.bf16.gmra.mxu0 %v2058
  %v7600 = vpop.f32.mrf.mxu0
  %v7601 = vadd.f32 %v7587, %v7600
  %v7602 = vpop.f32.mrf.mxu0
  %v7603 = vadd.f32 %v7589, %v7602
  %7604 = vdwg.mxu0
  %7605 = vmatpush.bf16.msra.mxu0 %v5760
  %7606 = vmatpush.bf16.msra.mxu0 %v5759
  %7607 = vmatpush.bf16.msra.mxu0 %v5758
  %7608 = vmatpush.bf16.msra.mxu0 %v5757
  %7609 = vmatpush.bf16.msra.mxu0 %v5756
  %7610 = vmatpush.bf16.msra.mxu0 %v5755
  %7611 = vmatpush.bf16.msra.mxu0 %v5754
  %7612 = vmatpush.bf16.msra.mxu0 %v5753
  %7613 = vmatmul.bf16.gmra.mxu0 %v2059
  %v7614 = vpop.f32.mrf.mxu0
  %v7615 = vadd.f32 %v7601, %v7614
  %v7616 = vpop.f32.mrf.mxu0
  %v7617 = vadd.f32 %v7603, %v7616
  %7618 = vdwg.mxu0
  %7619 = vmatpush.bf16.msra.mxu0 %v5768
  %7620 = vmatpush.bf16.msra.mxu0 %v5767
  %7621 = vmatpush.bf16.msra.mxu0 %v5766
  %7622 = vmatpush.bf16.msra.mxu0 %v5765
  %7623 = vmatpush.bf16.msra.mxu0 %v5764
  %7624 = vmatpush.bf16.msra.mxu0 %v5763
  %7625 = vmatpush.bf16.msra.mxu0 %v5762
  %7626 = vmatpush.bf16.msra.mxu0 %v5761
  %7627 = vmatmul.bf16.gmra.mxu0 %v2060
  %v7628 = vpop.f32.mrf.mxu0
  %v7629 = vadd.f32 %v7615, %v7628
  %v7630 = vpop.f32.mrf.mxu0
  %v7631 = vadd.f32 %v7617, %v7630
  %7632 = vdwg.mxu0
  %7633 = vmatpush.bf16.msra.mxu0 %v5776
  %7634 = vmatpush.bf16.msra.mxu0 %v5775
  %7635 = vmatpush.bf16.msra.mxu0 %v5774
  %7636 = vmatpush.bf16.msra.mxu0 %v5773
  %7637 = vmatpush.bf16.msra.mxu0 %v5772
  %7638 = vmatpush.bf16.msra.mxu0 %v5771
  %7639 = vmatpush.bf16.msra.mxu0 %v5770
  %7640 = vmatpush.bf16.msra.mxu0 %v5769
  %7641 = vmatmul.bf16.gmra.mxu0 %v2061
  %v7642 = vpop.f32.mrf.mxu0
  %v7643 = vadd.f32 %v7629, %v7642
  %v7644 = vpop.f32.mrf.mxu0
  %v7645 = vadd.f32 %v7631, %v7644
  %7646 = vdwg.mxu0
  %7647 = vmatpush.bf16.msra.mxu0 %v5784
  %7648 = vmatpush.bf16.msra.mxu0 %v5783
  %7649 = vmatpush.bf16.msra.mxu0 %v5782
  %7650 = vmatpush.bf16.msra.mxu0 %v5781
  %7651 = vmatpush.bf16.msra.mxu0 %v5780
  %7652 = vmatpush.bf16.msra.mxu0 %v5779
  %7653 = vmatpush.bf16.msra.mxu0 %v5778
  %7654 = vmatpush.bf16.msra.mxu0 %v5777
  %7655 = vmatmul.bf16.gmra.mxu0 %v2062
  %v7656 = vpop.f32.mrf.mxu0
  %v7657 = vadd.f32 %v7643, %v7656
  %v7658 = vpop.f32.mrf.mxu0
  %v7659 = vadd.f32 %v7645, %v7658
  %7660 = vdwg.mxu0
  %7661 = vmatpush.bf16.msra.mxu0 %v5792
  %7662 = vmatpush.bf16.msra.mxu0 %v5791
  %7663 = vmatpush.bf16.msra.mxu0 %v5790
  %7664 = vmatpush.bf16.msra.mxu0 %v5789
  %7665 = vmatpush.bf16.msra.mxu0 %v5788
  %7666 = vmatpush.bf16.msra.mxu0 %v5787
  %7667 = vmatpush.bf16.msra.mxu0 %v5786
  %7668 = vmatpush.bf16.msra.mxu0 %v5785
  %7669 = vmatmul.bf16.gmra.mxu0 %v2063
  %v7670 = vpop.f32.mrf.mxu0
  %v7671 = vadd.f32 %v7657, %v7670
  %v7672 = vpop.f32.mrf.mxu0
  %v7673 = vadd.f32 %v7659, %v7672
  %7674 = vdwg.mxu0
  %7675 = vmatpush.bf16.msra.mxu0 %v5800
  %7676 = vmatpush.bf16.msra.mxu0 %v5799
  %7677 = vmatpush.bf16.msra.mxu0 %v5798
  %7678 = vmatpush.bf16.msra.mxu0 %v5797
  %7679 = vmatpush.bf16.msra.mxu0 %v5796
  %7680 = vmatpush.bf16.msra.mxu0 %v5795
  %7681 = vmatpush.bf16.msra.mxu0 %v5794
  %7682 = vmatpush.bf16.msra.mxu0 %v5793
  %7683 = vmatmul.bf16.gmra.mxu0 %v2064
  %v7684 = vpop.f32.mrf.mxu0
  %v7685 = vadd.f32 %v7671, %v7684
  %v7686 = vpop.f32.mrf.mxu0
  %v7687 = vadd.f32 %v7673, %v7686
  %7688 = vdwg.mxu0
  %7689 = vmatpush.bf16.msra.mxu0 %v5808
  %7690 = vmatpush.bf16.msra.mxu0 %v5807
  %7691 = vmatpush.bf16.msra.mxu0 %v5806
  %7692 = vmatpush.bf16.msra.mxu0 %v5805
  %7693 = vmatpush.bf16.msra.mxu0 %v5804
  %7694 = vmatpush.bf16.msra.mxu0 %v5803
  %7695 = vmatpush.bf16.msra.mxu0 %v5802
  %7696 = vmatpush.bf16.msra.mxu0 %v5801
  %7697 = vmatmul.bf16.gmra.mxu0 %v2065
  %v7698 = vpop.f32.mrf.mxu0
  %v7699 = vadd.f32 %v7685, %v7698
  %v7700 = vpop.f32.mrf.mxu0
  %v7701 = vadd.f32 %v7687, %v7700
  %7702 = vdwg.mxu0
  %7703 = vmatpush.bf16.msra.mxu0 %v5816
  %7704 = vmatpush.bf16.msra.mxu0 %v5815
  %7705 = vmatpush.bf16.msra.mxu0 %v5814
  %7706 = vmatpush.bf16.msra.mxu0 %v5813
  %7707 = vmatpush.bf16.msra.mxu0 %v5812
  %7708 = vmatpush.bf16.msra.mxu0 %v5811
  %7709 = vmatpush.bf16.msra.mxu0 %v5810
  %7710 = vmatpush.bf16.msra.mxu0 %v5809
  %7711 = vmatmul.bf16.gmra.mxu0 %v2066
  %v7712 = vpop.f32.mrf.mxu0
  %v7713 = vadd.f32 %v7699, %v7712
  %v7714 = vpop.f32.mrf.mxu0
  %v7715 = vadd.f32 %v7701, %v7714
  %7716 = vdwg.mxu0
  %7717 = vmatpush.bf16.msra.mxu0 %v5824
  %7718 = vmatpush.bf16.msra.mxu0 %v5823
  %7719 = vmatpush.bf16.msra.mxu0 %v5822
  %7720 = vmatpush.bf16.msra.mxu0 %v5821
  %7721 = vmatpush.bf16.msra.mxu0 %v5820
  %7722 = vmatpush.bf16.msra.mxu0 %v5819
  %7723 = vmatpush.bf16.msra.mxu0 %v5818
  %7724 = vmatpush.bf16.msra.mxu0 %v5817
  %7725 = vmatmul.bf16.gmra.mxu0 %v2067
  %v7726 = vpop.f32.mrf.mxu0
  %v7727 = vadd.f32 %v7713, %v7726
  %v7728 = vpop.f32.mrf.mxu0
  %v7729 = vadd.f32 %v7715, %v7728
  %7730 = vdwg.mxu0
  %7731 = vmatpush.bf16.msra.mxu0 %v5832
  %7732 = vmatpush.bf16.msra.mxu0 %v5831
  %7733 = vmatpush.bf16.msra.mxu0 %v5830
  %7734 = vmatpush.bf16.msra.mxu0 %v5829
  %7735 = vmatpush.bf16.msra.mxu0 %v5828
  %7736 = vmatpush.bf16.msra.mxu0 %v5827
  %7737 = vmatpush.bf16.msra.mxu0 %v5826
  %7738 = vmatpush.bf16.msra.mxu0 %v5825
  %7739 = vmatmul.bf16.gmra.mxu0 %v2068
  %v7740 = vpop.f32.mrf.mxu0
  %v7741 = vadd.f32 %v7727, %v7740
  %v7742 = vpop.f32.mrf.mxu0
  %v7743 = vadd.f32 %v7729, %v7742
  %7744 = vdwg.mxu0
  %7745 = vmatpush.bf16.msra.mxu0 %v5840
  %7746 = vmatpush.bf16.msra.mxu0 %v5839
  %7747 = vmatpush.bf16.msra.mxu0 %v5838
  %7748 = vmatpush.bf16.msra.mxu0 %v5837
  %7749 = vmatpush.bf16.msra.mxu0 %v5836
  %7750 = vmatpush.bf16.msra.mxu0 %v5835
  %7751 = vmatpush.bf16.msra.mxu0 %v5834
  %7752 = vmatpush.bf16.msra.mxu0 %v5833
  %7753 = vmatmul.bf16.gmra.mxu0 %v2069
  %v7754 = vpop.f32.mrf.mxu0
  %v7755 = vadd.f32 %v7741, %v7754
  %v7756 = vpop.f32.mrf.mxu0
  %v7757 = vadd.f32 %v7743, %v7756
  %7758 = vdwg.mxu0
  %7759 = vmatpush.bf16.msra.mxu0 %v5848
  %7760 = vmatpush.bf16.msra.mxu0 %v5847
  %7761 = vmatpush.bf16.msra.mxu0 %v5846
  %7762 = vmatpush.bf16.msra.mxu0 %v5845
  %7763 = vmatpush.bf16.msra.mxu0 %v5844
  %7764 = vmatpush.bf16.msra.mxu0 %v5843
  %7765 = vmatpush.bf16.msra.mxu0 %v5842
  %7766 = vmatpush.bf16.msra.mxu0 %v5841
  %7767 = vmatmul.bf16.gmra.mxu0 %v2070
  %v7768 = vpop.f32.mrf.mxu0
  %v7769 = vadd.f32 %v7755, %v7768
  %v7770 = vpop.f32.mrf.mxu0
  %v7771 = vadd.f32 %v7757, %v7770
  %7772 = vdwg.mxu0
  %7773 = vmatpush.bf16.msra.mxu0 %v5856
  %7774 = vmatpush.bf16.msra.mxu0 %v5855
  %7775 = vmatpush.bf16.msra.mxu0 %v5854
  %7776 = vmatpush.bf16.msra.mxu0 %v5853
  %7777 = vmatpush.bf16.msra.mxu0 %v5852
  %7778 = vmatpush.bf16.msra.mxu0 %v5851
  %7779 = vmatpush.bf16.msra.mxu0 %v5850
  %7780 = vmatpush.bf16.msra.mxu0 %v5849
  %7781 = vmatmul.bf16.gmra.mxu0 %v2071
  %v7782 = vpop.f32.mrf.mxu0
  %v7783 = vadd.f32 %v7769, %v7782
  %v7784 = vpop.f32.mrf.mxu0
  %v7785 = vadd.f32 %v7771, %v7784
  %7786 = vdwg.mxu0
  %7787 = vmatpush.bf16.msra.mxu0 %v5864
  %7788 = vmatpush.bf16.msra.mxu0 %v5863
  %7789 = vmatpush.bf16.msra.mxu0 %v5862
  %7790 = vmatpush.bf16.msra.mxu0 %v5861
  %7791 = vmatpush.bf16.msra.mxu0 %v5860
  %7792 = vmatpush.bf16.msra.mxu0 %v5859
  %7793 = vmatpush.bf16.msra.mxu0 %v5858
  %7794 = vmatpush.bf16.msra.mxu0 %v5857
  %7795 = vmatmul.bf16.gmra.mxu0 %v2072
  %v7796 = vpop.f32.mrf.mxu0
  %v7797 = vadd.f32 %v7783, %v7796
  %v7798 = vpop.f32.mrf.mxu0
  %v7799 = vadd.f32 %v7785, %v7798
  %7800 = vdwg.mxu0
  %7801 = vmatpush.bf16.msra.mxu0 %v5872
  %7802 = vmatpush.bf16.msra.mxu0 %v5871
  %7803 = vmatpush.bf16.msra.mxu0 %v5870
  %7804 = vmatpush.bf16.msra.mxu0 %v5869
  %7805 = vmatpush.bf16.msra.mxu0 %v5868
  %7806 = vmatpush.bf16.msra.mxu0 %v5867
  %7807 = vmatpush.bf16.msra.mxu0 %v5866
  %7808 = vmatpush.bf16.msra.mxu0 %v5865
  %7809 = vmatmul.bf16.gmra.mxu0 %v2073
  %v7810 = vpop.f32.mrf.mxu0
  %v7811 = vadd.f32 %v7797, %v7810
  %v7812 = vpop.f32.mrf.mxu0
  %v7813 = vadd.f32 %v7799, %v7812
  %7814 = vdwg.mxu0
  %7815 = vmatpush.bf16.msra.mxu0 %v5880
  %7816 = vmatpush.bf16.msra.mxu0 %v5879
  %7817 = vmatpush.bf16.msra.mxu0 %v5878
  %7818 = vmatpush.bf16.msra.mxu0 %v5877
  %7819 = vmatpush.bf16.msra.mxu0 %v5876
  %7820 = vmatpush.bf16.msra.mxu0 %v5875
  %7821 = vmatpush.bf16.msra.mxu0 %v5874
  %7822 = vmatpush.bf16.msra.mxu0 %v5873
  %7823 = vmatmul.bf16.gmra.mxu0 %v2074
  %v7824 = vpop.f32.mrf.mxu0
  %v7825 = vadd.f32 %v7811, %v7824
  %v7826 = vpop.f32.mrf.mxu0
  %v7827 = vadd.f32 %v7813, %v7826
  %7828 = vdwg.mxu0
  %7829 = vmatpush.bf16.msra.mxu0 %v5888
  %7830 = vmatpush.bf16.msra.mxu0 %v5887
  %7831 = vmatpush.bf16.msra.mxu0 %v5886
  %7832 = vmatpush.bf16.msra.mxu0 %v5885
  %7833 = vmatpush.bf16.msra.mxu0 %v5884
  %7834 = vmatpush.bf16.msra.mxu0 %v5883
  %7835 = vmatpush.bf16.msra.mxu0 %v5882
  %7836 = vmatpush.bf16.msra.mxu0 %v5881
  %7837 = vmatmul.bf16.gmra.mxu0 %v2075
  %v7838 = vpop.f32.mrf.mxu0
  %v7839 = vadd.f32 %v7825, %v7838
  %v7840 = vpop.f32.mrf.mxu0
  %v7841 = vadd.f32 %v7827, %v7840
  %7842 = vdwg.mxu0
  %7843 = vmatpush.bf16.msra.mxu0 %v5896
  %7844 = vmatpush.bf16.msra.mxu0 %v5895
  %7845 = vmatpush.bf16.msra.mxu0 %v5894
  %7846 = vmatpush.bf16.msra.mxu0 %v5893
  %7847 = vmatpush.bf16.msra.mxu0 %v5892
  %7848 = vmatpush.bf16.msra.mxu0 %v5891
  %7849 = vmatpush.bf16.msra.mxu0 %v5890
  %7850 = vmatpush.bf16.msra.mxu0 %v5889
  %7851 = vmatmul.bf16.gmra.mxu0 %v2076
  %v7852 = vpop.f32.mrf.mxu0
  %v7853 = vadd.f32 %v7839, %v7852
  %v7854 = vpop.f32.mrf.mxu0
  %v7855 = vadd.f32 %v7841, %v7854
  %7856 = vdwg.mxu0
  %7857 = vmatpush.bf16.msra.mxu0 %v5904
  %7858 = vmatpush.bf16.msra.mxu0 %v5903
  %7859 = vmatpush.bf16.msra.mxu0 %v5902
  %7860 = vmatpush.bf16.msra.mxu0 %v5901
  %7861 = vmatpush.bf16.msra.mxu0 %v5900
  %7862 = vmatpush.bf16.msra.mxu0 %v5899
  %7863 = vmatpush.bf16.msra.mxu0 %v5898
  %7864 = vmatpush.bf16.msra.mxu0 %v5897
  %7865 = vmatmul.bf16.gmra.mxu0 %v2077
  %v7866 = vpop.f32.mrf.mxu0
  %v7867 = vadd.f32 %v7853, %v7866
  %v7868 = vpop.f32.mrf.mxu0
  %v7869 = vadd.f32 %v7855, %v7868
  %7870 = vdwg.mxu0
  %7871 = vmatpush.bf16.msra.mxu0 %v5912
  %7872 = vmatpush.bf16.msra.mxu0 %v5911
  %7873 = vmatpush.bf16.msra.mxu0 %v5910
  %7874 = vmatpush.bf16.msra.mxu0 %v5909
  %7875 = vmatpush.bf16.msra.mxu0 %v5908
  %7876 = vmatpush.bf16.msra.mxu0 %v5907
  %7877 = vmatpush.bf16.msra.mxu0 %v5906
  %7878 = vmatpush.bf16.msra.mxu0 %v5905
  %7879 = vmatmul.bf16.gmra.mxu0 %v2078
  %v7880 = vpop.f32.mrf.mxu0
  %v7881 = vadd.f32 %v7867, %v7880
  %v7882 = vpop.f32.mrf.mxu0
  %v7883 = vadd.f32 %v7869, %v7882
  %7884 = vdwg.mxu0
  %7885 = vmatpush.bf16.msra.mxu0 %v5920
  %7886 = vmatpush.bf16.msra.mxu0 %v5919
  %7887 = vmatpush.bf16.msra.mxu0 %v5918
  %7888 = vmatpush.bf16.msra.mxu0 %v5917
  %7889 = vmatpush.bf16.msra.mxu0 %v5916
  %7890 = vmatpush.bf16.msra.mxu0 %v5915
  %7891 = vmatpush.bf16.msra.mxu0 %v5914
  %7892 = vmatpush.bf16.msra.mxu0 %v5913
  %7893 = vmatmul.bf16.gmra.mxu0 %v2079
  %v7894 = vpop.f32.mrf.mxu0
  %v7895 = vadd.f32 %v7881, %v7894
  %v7896 = vpop.f32.mrf.mxu0
  %v7897 = vadd.f32 %v7883, %v7896
  %7898 = vdwg.mxu0
  %7899 = vmatpush.bf16.msra.mxu0 %v5928
  %7900 = vmatpush.bf16.msra.mxu0 %v5927
  %7901 = vmatpush.bf16.msra.mxu0 %v5926
  %7902 = vmatpush.bf16.msra.mxu0 %v5925
  %7903 = vmatpush.bf16.msra.mxu0 %v5924
  %7904 = vmatpush.bf16.msra.mxu0 %v5923
  %7905 = vmatpush.bf16.msra.mxu0 %v5922
  %7906 = vmatpush.bf16.msra.mxu0 %v5921
  %7907 = vmatmul.bf16.gmra.mxu0 %v2080
  %v7908 = vpop.f32.mrf.mxu0
  %v7909 = vadd.f32 %v7895, %v7908
  %v7910 = vpop.f32.mrf.mxu0
  %v7911 = vadd.f32 %v7897, %v7910
  %7912 = vdwg.mxu0
  %7913 = vmatpush.bf16.msra.mxu0 %v5936
  %7914 = vmatpush.bf16.msra.mxu0 %v5935
  %7915 = vmatpush.bf16.msra.mxu0 %v5934
  %7916 = vmatpush.bf16.msra.mxu0 %v5933
  %7917 = vmatpush.bf16.msra.mxu0 %v5932
  %7918 = vmatpush.bf16.msra.mxu0 %v5931
  %7919 = vmatpush.bf16.msra.mxu0 %v5930
  %7920 = vmatpush.bf16.msra.mxu0 %v5929
  %7921 = vmatmul.bf16.gmra.mxu0 %v2081
  %v7922 = vpop.f32.mrf.mxu0
  %v7923 = vadd.f32 %v7909, %v7922
  %v7924 = vpop.f32.mrf.mxu0
  %v7925 = vadd.f32 %v7911, %v7924
  %7926 = vdwg.mxu0
  %7927 = vmatpush.bf16.msra.mxu0 %v5944
  %7928 = vmatpush.bf16.msra.mxu0 %v5943
  %7929 = vmatpush.bf16.msra.mxu0 %v5942
  %7930 = vmatpush.bf16.msra.mxu0 %v5941
  %7931 = vmatpush.bf16.msra.mxu0 %v5940
  %7932 = vmatpush.bf16.msra.mxu0 %v5939
  %7933 = vmatpush.bf16.msra.mxu0 %v5938
  %7934 = vmatpush.bf16.msra.mxu0 %v5937
  %7935 = vmatmul.bf16.gmra.mxu0 %v2082
  %v7936 = vpop.f32.mrf.mxu0
  %v7937 = vadd.f32 %v7923, %v7936
  %v7938 = vpop.f32.mrf.mxu0
  %v7939 = vadd.f32 %v7925, %v7938
  %7940 = vdwg.mxu0
  %7941 = vmatpush.bf16.msra.mxu0 %v5952
  %7942 = vmatpush.bf16.msra.mxu0 %v5951
  %7943 = vmatpush.bf16.msra.mxu0 %v5950
  %7944 = vmatpush.bf16.msra.mxu0 %v5949
  %7945 = vmatpush.bf16.msra.mxu0 %v5948
  %7946 = vmatpush.bf16.msra.mxu0 %v5947
  %7947 = vmatpush.bf16.msra.mxu0 %v5946
  %7948 = vmatpush.bf16.msra.mxu0 %v5945
  %7949 = vmatmul.bf16.gmra.mxu0 %v2083
  %v7950 = vpop.f32.mrf.mxu0
  %v7951 = vadd.f32 %v7937, %v7950
  %v7952 = vpop.f32.mrf.mxu0
  %v7953 = vadd.f32 %v7939, %v7952
  %7954 = vdwg.mxu0
  %7955 = vmatpush.bf16.msra.mxu0 %v5960
  %7956 = vmatpush.bf16.msra.mxu0 %v5959
  %7957 = vmatpush.bf16.msra.mxu0 %v5958
  %7958 = vmatpush.bf16.msra.mxu0 %v5957
  %7959 = vmatpush.bf16.msra.mxu0 %v5956
  %7960 = vmatpush.bf16.msra.mxu0 %v5955
  %7961 = vmatpush.bf16.msra.mxu0 %v5954
  %7962 = vmatpush.bf16.msra.mxu0 %v5953
  %7963 = vmatmul.bf16.gmra.mxu0 %v2084
  %v7964 = vpop.f32.mrf.mxu0
  %v7965 = vadd.f32 %v7951, %v7964
  %v7966 = vpop.f32.mrf.mxu0
  %v7967 = vadd.f32 %v7953, %v7966
  %7968 = vdwg.mxu0
  %7969 = vmatpush.bf16.msra.mxu0 %v5968
  %7970 = vmatpush.bf16.msra.mxu0 %v5967
  %7971 = vmatpush.bf16.msra.mxu0 %v5966
  %7972 = vmatpush.bf16.msra.mxu0 %v5965
  %7973 = vmatpush.bf16.msra.mxu0 %v5964
  %7974 = vmatpush.bf16.msra.mxu0 %v5963
  %7975 = vmatpush.bf16.msra.mxu0 %v5962
  %7976 = vmatpush.bf16.msra.mxu0 %v5961
  %7977 = vmatmul.bf16.gmra.mxu0 %v2085
  %v7978 = vpop.f32.mrf.mxu0
  %v7979 = vadd.f32 %v7965, %v7978
  %v7980 = vpop.f32.mrf.mxu0
  %v7981 = vadd.f32 %v7967, %v7980
  %7982 = vdwg.mxu0
  %7983 = vmatpush.bf16.msra.mxu0 %v5976
  %7984 = vmatpush.bf16.msra.mxu0 %v5975
  %7985 = vmatpush.bf16.msra.mxu0 %v5974
  %7986 = vmatpush.bf16.msra.mxu0 %v5973
  %7987 = vmatpush.bf16.msra.mxu0 %v5972
  %7988 = vmatpush.bf16.msra.mxu0 %v5971
  %7989 = vmatpush.bf16.msra.mxu0 %v5970
  %7990 = vmatpush.bf16.msra.mxu0 %v5969
  %7991 = vmatmul.bf16.gmra.mxu0 %v2086
  %v7992 = vpop.f32.mrf.mxu0
  %v7993 = vadd.f32 %v7979, %v7992
  %v7994 = vpop.f32.mrf.mxu0
  %v7995 = vadd.f32 %v7981, %v7994
  %7996 = vdwg.mxu0
  %7997 = vmatpush.bf16.msra.mxu0 %v5984
  %7998 = vmatpush.bf16.msra.mxu0 %v5983
  %7999 = vmatpush.bf16.msra.mxu0 %v5982
  %8000 = vmatpush.bf16.msra.mxu0 %v5981
  %8001 = vmatpush.bf16.msra.mxu0 %v5980
  %8002 = vmatpush.bf16.msra.mxu0 %v5979
  %8003 = vmatpush.bf16.msra.mxu0 %v5978
  %8004 = vmatpush.bf16.msra.mxu0 %v5977
  %8005 = vmatmul.bf16.gmra.mxu0 %v2087
  %v8006 = vpop.f32.mrf.mxu0
  %v8007 = vadd.f32 %v7993, %v8006
  %v8008 = vpop.f32.mrf.mxu0
  %v8009 = vadd.f32 %v7995, %v8008
  %8010 = vdwg.mxu0
  %8011 = vmatpush.bf16.msra.mxu0 %v5992
  %8012 = vmatpush.bf16.msra.mxu0 %v5991
  %8013 = vmatpush.bf16.msra.mxu0 %v5990
  %8014 = vmatpush.bf16.msra.mxu0 %v5989
  %8015 = vmatpush.bf16.msra.mxu0 %v5988
  %8016 = vmatpush.bf16.msra.mxu0 %v5987
  %8017 = vmatpush.bf16.msra.mxu0 %v5986
  %8018 = vmatpush.bf16.msra.mxu0 %v5985
  %8019 = vmatmul.bf16.gmra.mxu0 %v2088
  %v8020 = vpop.f32.mrf.mxu0
  %v8021 = vadd.f32 %v8007, %v8020
  %v8022 = vpop.f32.mrf.mxu0
  %v8023 = vadd.f32 %v8009, %v8022
  %8024 = vdwg.mxu0
  %8025 = vmatpush.bf16.msra.mxu0 %v6000
  %8026 = vmatpush.bf16.msra.mxu0 %v5999
  %8027 = vmatpush.bf16.msra.mxu0 %v5998
  %8028 = vmatpush.bf16.msra.mxu0 %v5997
  %8029 = vmatpush.bf16.msra.mxu0 %v5996
  %8030 = vmatpush.bf16.msra.mxu0 %v5995
  %8031 = vmatpush.bf16.msra.mxu0 %v5994
  %8032 = vmatpush.bf16.msra.mxu0 %v5993
  %8033 = vmatmul.bf16.gmra.mxu0 %v2089
  %v8034 = vpop.f32.mrf.mxu0
  %v8035 = vadd.f32 %v8021, %v8034
  %v8036 = vpop.f32.mrf.mxu0
  %v8037 = vadd.f32 %v8023, %v8036
  %8038 = vdwg.mxu0
  %8039 = vmatpush.bf16.msra.mxu0 %v6008
  %8040 = vmatpush.bf16.msra.mxu0 %v6007
  %8041 = vmatpush.bf16.msra.mxu0 %v6006
  %8042 = vmatpush.bf16.msra.mxu0 %v6005
  %8043 = vmatpush.bf16.msra.mxu0 %v6004
  %8044 = vmatpush.bf16.msra.mxu0 %v6003
  %8045 = vmatpush.bf16.msra.mxu0 %v6002
  %8046 = vmatpush.bf16.msra.mxu0 %v6001
  %8047 = vmatmul.bf16.gmra.mxu0 %v2090
  %v8048 = vpop.f32.mrf.mxu0
  %v8049 = vadd.f32 %v8035, %v8048
  %v8050 = vpop.f32.mrf.mxu0
  %v8051 = vadd.f32 %v8037, %v8050
  %8052 = vdwg.mxu0
  %8053 = vmatpush.bf16.msra.mxu0 %v6016
  %8054 = vmatpush.bf16.msra.mxu0 %v6015
  %8055 = vmatpush.bf16.msra.mxu0 %v6014
  %8056 = vmatpush.bf16.msra.mxu0 %v6013
  %8057 = vmatpush.bf16.msra.mxu0 %v6012
  %8058 = vmatpush.bf16.msra.mxu0 %v6011
  %8059 = vmatpush.bf16.msra.mxu0 %v6010
  %8060 = vmatpush.bf16.msra.mxu0 %v6009
  %8061 = vmatmul.bf16.gmra.mxu0 %v2091
  %v8062 = vpop.f32.mrf.mxu0
  %v8063 = vadd.f32 %v8049, %v8062
  %v8064 = vpop.f32.mrf.mxu0
  %v8065 = vadd.f32 %v8051, %v8064
  %8066 = vdwg.mxu0
  %8067 = vmatpush.bf16.msra.mxu0 %v6024
  %8068 = vmatpush.bf16.msra.mxu0 %v6023
  %8069 = vmatpush.bf16.msra.mxu0 %v6022
  %8070 = vmatpush.bf16.msra.mxu0 %v6021
  %8071 = vmatpush.bf16.msra.mxu0 %v6020
  %8072 = vmatpush.bf16.msra.mxu0 %v6019
  %8073 = vmatpush.bf16.msra.mxu0 %v6018
  %8074 = vmatpush.bf16.msra.mxu0 %v6017
  %8075 = vmatmul.bf16.gmra.mxu0 %v2092
  %v8076 = vpop.f32.mrf.mxu0
  %v8077 = vadd.f32 %v8063, %v8076
  %v8078 = vpop.f32.mrf.mxu0
  %v8079 = vadd.f32 %v8065, %v8078
  %8080 = vdwg.mxu0
  %8081 = vmatpush.bf16.msra.mxu0 %v6032
  %8082 = vmatpush.bf16.msra.mxu0 %v6031
  %8083 = vmatpush.bf16.msra.mxu0 %v6030
  %8084 = vmatpush.bf16.msra.mxu0 %v6029
  %8085 = vmatpush.bf16.msra.mxu0 %v6028
  %8086 = vmatpush.bf16.msra.mxu0 %v6027
  %8087 = vmatpush.bf16.msra.mxu0 %v6026
  %8088 = vmatpush.bf16.msra.mxu0 %v6025
  %8089 = vmatmul.bf16.gmra.mxu0 %v2093
  %v8090 = vpop.f32.mrf.mxu0
  %v8091 = vadd.f32 %v8077, %v8090
  %v8092 = vpop.f32.mrf.mxu0
  %v8093 = vadd.f32 %v8079, %v8092
  %8094 = vdwg.mxu0
  %8095 = vmatpush.bf16.msra.mxu0 %v6040
  %8096 = vmatpush.bf16.msra.mxu0 %v6039
  %8097 = vmatpush.bf16.msra.mxu0 %v6038
  %8098 = vmatpush.bf16.msra.mxu0 %v6037
  %8099 = vmatpush.bf16.msra.mxu0 %v6036
  %8100 = vmatpush.bf16.msra.mxu0 %v6035
  %8101 = vmatpush.bf16.msra.mxu0 %v6034
  %8102 = vmatpush.bf16.msra.mxu0 %v6033
  %8103 = vmatmul.bf16.gmra.mxu0 %v2094
  %v8104 = vpop.f32.mrf.mxu0
  %v8105 = vadd.f32 %v8091, %v8104
  %v8106 = vpop.f32.mrf.mxu0
  %v8107 = vadd.f32 %v8093, %v8106
  %8108 = vdwg.mxu0
  %8109 = vmatpush.bf16.msra.mxu0 %v6048
  %8110 = vmatpush.bf16.msra.mxu0 %v6047
  %8111 = vmatpush.bf16.msra.mxu0 %v6046
  %8112 = vmatpush.bf16.msra.mxu0 %v6045
  %8113 = vmatpush.bf16.msra.mxu0 %v6044
  %8114 = vmatpush.bf16.msra.mxu0 %v6043
  %8115 = vmatpush.bf16.msra.mxu0 %v6042
  %8116 = vmatpush.bf16.msra.mxu0 %v6041
  %8117 = vmatmul.bf16.gmra.mxu0 %v2095
  %v8118 = vpop.f32.mrf.mxu0
  %v8119 = vadd.f32 %v8105, %v8118
  %v8120 = vpop.f32.mrf.mxu0
  %v8121 = vadd.f32 %v8107, %v8120
  %8122 = vdwg.mxu0
  %8123 = vmatpush.bf16.msra.mxu0 %v6056
  %8124 = vmatpush.bf16.msra.mxu0 %v6055
  %8125 = vmatpush.bf16.msra.mxu0 %v6054
  %8126 = vmatpush.bf16.msra.mxu0 %v6053
  %8127 = vmatpush.bf16.msra.mxu0 %v6052
  %8128 = vmatpush.bf16.msra.mxu0 %v6051
  %8129 = vmatpush.bf16.msra.mxu0 %v6050
  %8130 = vmatpush.bf16.msra.mxu0 %v6049
  %8131 = vmatmul.bf16.gmra.mxu0 %v2096
  %v8132 = vpop.f32.mrf.mxu0
  %v8133 = vadd.f32 %v8119, %v8132
  %v8134 = vpop.f32.mrf.mxu0
  %v8135 = vadd.f32 %v8121, %v8134
  %8136 = vdwg.mxu0
  %8137 = vmatpush.bf16.msra.mxu0 %v6064
  %8138 = vmatpush.bf16.msra.mxu0 %v6063
  %8139 = vmatpush.bf16.msra.mxu0 %v6062
  %8140 = vmatpush.bf16.msra.mxu0 %v6061
  %8141 = vmatpush.bf16.msra.mxu0 %v6060
  %8142 = vmatpush.bf16.msra.mxu0 %v6059
  %8143 = vmatpush.bf16.msra.mxu0 %v6058
  %8144 = vmatpush.bf16.msra.mxu0 %v6057
  %8145 = vmatmul.bf16.gmra.mxu0 %v2097
  %v8146 = vpop.f32.mrf.mxu0
  %v8147 = vadd.f32 %v8133, %v8146
  %v8148 = vpop.f32.mrf.mxu0
  %v8149 = vadd.f32 %v8135, %v8148
  %8150 = vdwg.mxu0
  %8151 = vmatpush.bf16.msra.mxu0 %v6072
  %8152 = vmatpush.bf16.msra.mxu0 %v6071
  %8153 = vmatpush.bf16.msra.mxu0 %v6070
  %8154 = vmatpush.bf16.msra.mxu0 %v6069
  %8155 = vmatpush.bf16.msra.mxu0 %v6068
  %8156 = vmatpush.bf16.msra.mxu0 %v6067
  %8157 = vmatpush.bf16.msra.mxu0 %v6066
  %8158 = vmatpush.bf16.msra.mxu0 %v6065
  %8159 = vmatmul.bf16.gmra.mxu0 %v2098
  %v8160 = vpop.f32.mrf.mxu0
  %v8161 = vadd.f32 %v8147, %v8160
  %v8162 = vpop.f32.mrf.mxu0
  %v8163 = vadd.f32 %v8149, %v8162
  %8164 = vdwg.mxu0
  %8165 = vmatpush.bf16.msra.mxu0 %v6080
  %8166 = vmatpush.bf16.msra.mxu0 %v6079
  %8167 = vmatpush.bf16.msra.mxu0 %v6078
  %8168 = vmatpush.bf16.msra.mxu0 %v6077
  %8169 = vmatpush.bf16.msra.mxu0 %v6076
  %8170 = vmatpush.bf16.msra.mxu0 %v6075
  %8171 = vmatpush.bf16.msra.mxu0 %v6074
  %8172 = vmatpush.bf16.msra.mxu0 %v6073
  %8173 = vmatmul.bf16.gmra.mxu0 %v2099
  %v8174 = vpop.f32.mrf.mxu0
  %v8175 = vadd.f32 %v8161, %v8174
  %v8176 = vpop.f32.mrf.mxu0
  %v8177 = vadd.f32 %v8163, %v8176
  %8178 = vdwg.mxu0
  %8179 = vmatpush.bf16.msra.mxu0 %v6088
  %8180 = vmatpush.bf16.msra.mxu0 %v6087
  %8181 = vmatpush.bf16.msra.mxu0 %v6086
  %8182 = vmatpush.bf16.msra.mxu0 %v6085
  %8183 = vmatpush.bf16.msra.mxu0 %v6084
  %8184 = vmatpush.bf16.msra.mxu0 %v6083
  %8185 = vmatpush.bf16.msra.mxu0 %v6082
  %8186 = vmatpush.bf16.msra.mxu0 %v6081
  %8187 = vmatmul.bf16.gmra.mxu0 %v2100
  %v8188 = vpop.f32.mrf.mxu0
  %v8189 = vadd.f32 %v8175, %v8188
  %v8190 = vpop.f32.mrf.mxu0
  %v8191 = vadd.f32 %v8177, %v8190
  %8192 = vdwg.mxu0
  %8193 = vmatpush.bf16.msra.mxu0 %v6096
  %8194 = vmatpush.bf16.msra.mxu0 %v6095
  %8195 = vmatpush.bf16.msra.mxu0 %v6094
  %8196 = vmatpush.bf16.msra.mxu0 %v6093
  %8197 = vmatpush.bf16.msra.mxu0 %v6092
  %8198 = vmatpush.bf16.msra.mxu0 %v6091
  %8199 = vmatpush.bf16.msra.mxu0 %v6090
  %8200 = vmatpush.bf16.msra.mxu0 %v6089
  %8201 = vmatmul.bf16.gmra.mxu0 %v2101
  %v8202 = vpop.f32.mrf.mxu0
  %v8203 = vadd.f32 %v8189, %v8202
  %v8204 = vpop.f32.mrf.mxu0
  %v8205 = vadd.f32 %v8191, %v8204
  %8206 = vdwg.mxu0
  %8207 = vmatpush.bf16.msra.mxu0 %v6104
  %8208 = vmatpush.bf16.msra.mxu0 %v6103
  %8209 = vmatpush.bf16.msra.mxu0 %v6102
  %8210 = vmatpush.bf16.msra.mxu0 %v6101
  %8211 = vmatpush.bf16.msra.mxu0 %v6100
  %8212 = vmatpush.bf16.msra.mxu0 %v6099
  %8213 = vmatpush.bf16.msra.mxu0 %v6098
  %8214 = vmatpush.bf16.msra.mxu0 %v6097
  %8215 = vmatmul.bf16.gmra.mxu0 %v2102
  %v8216 = vpop.f32.mrf.mxu0
  %v8217 = vadd.f32 %v8203, %v8216
  %v8218 = vpop.f32.mrf.mxu0
  %v8219 = vadd.f32 %v8205, %v8218
  %8220 = vdwg.mxu0
  %8221 = vmatpush.bf16.msra.mxu0 %v6112
  %8222 = vmatpush.bf16.msra.mxu0 %v6111
  %8223 = vmatpush.bf16.msra.mxu0 %v6110
  %8224 = vmatpush.bf16.msra.mxu0 %v6109
  %8225 = vmatpush.bf16.msra.mxu0 %v6108
  %8226 = vmatpush.bf16.msra.mxu0 %v6107
  %8227 = vmatpush.bf16.msra.mxu0 %v6106
  %8228 = vmatpush.bf16.msra.mxu0 %v6105
  %8229 = vmatmul.bf16.gmra.mxu0 %v2103
  %v8230 = vpop.f32.mrf.mxu0
  %v8231 = vadd.f32 %v8217, %v8230
  %v8232 = vpop.f32.mrf.mxu0
  %v8233 = vadd.f32 %v8219, %v8232
  %8234 = vdwg.mxu0
  %8235 = vmatpush.bf16.msra.mxu0 %v6120
  %8236 = vmatpush.bf16.msra.mxu0 %v6119
  %8237 = vmatpush.bf16.msra.mxu0 %v6118
  %8238 = vmatpush.bf16.msra.mxu0 %v6117
  %8239 = vmatpush.bf16.msra.mxu0 %v6116
  %8240 = vmatpush.bf16.msra.mxu0 %v6115
  %8241 = vmatpush.bf16.msra.mxu0 %v6114
  %8242 = vmatpush.bf16.msra.mxu0 %v6113
  %8243 = vmatmul.bf16.gmra.mxu0 %v2104
  %v8244 = vpop.f32.mrf.mxu0
  %v8245 = vadd.f32 %v8231, %v8244
  %v8246 = vpop.f32.mrf.mxu0
  %v8247 = vadd.f32 %v8233, %v8246
  %8248 = vdwg.mxu0
  %8249 = vmatpush.bf16.msra.mxu0 %v6128
  %8250 = vmatpush.bf16.msra.mxu0 %v6127
  %8251 = vmatpush.bf16.msra.mxu0 %v6126
  %8252 = vmatpush.bf16.msra.mxu0 %v6125
  %8253 = vmatpush.bf16.msra.mxu0 %v6124
  %8254 = vmatpush.bf16.msra.mxu0 %v6123
  %8255 = vmatpush.bf16.msra.mxu0 %v6122
  %8256 = vmatpush.bf16.msra.mxu0 %v6121
  %8257 = vmatmul.bf16.gmra.mxu0 %v2105
  %v8258 = vpop.f32.mrf.mxu0
  %v8259 = vadd.f32 %v8245, %v8258
  %v8260 = vpop.f32.mrf.mxu0
  %v8261 = vadd.f32 %v8247, %v8260
  %8262 = vdwg.mxu0
  %8263 = vmatpush.bf16.msra.mxu0 %v6136
  %8264 = vmatpush.bf16.msra.mxu0 %v6135
  %8265 = vmatpush.bf16.msra.mxu0 %v6134
  %8266 = vmatpush.bf16.msra.mxu0 %v6133
  %8267 = vmatpush.bf16.msra.mxu0 %v6132
  %8268 = vmatpush.bf16.msra.mxu0 %v6131
  %8269 = vmatpush.bf16.msra.mxu0 %v6130
  %8270 = vmatpush.bf16.msra.mxu0 %v6129
  %8271 = vmatmul.bf16.gmra.mxu0 %v2106
  %v8272 = vpop.f32.mrf.mxu0
  %v8273 = vadd.f32 %v8259, %v8272
  %v8274 = vpop.f32.mrf.mxu0
  %v8275 = vadd.f32 %v8261, %v8274
  %8276 = vdwg.mxu0
  %8277 = vmatpush.bf16.msra.mxu0 %v6144
  %8278 = vmatpush.bf16.msra.mxu0 %v6143
  %8279 = vmatpush.bf16.msra.mxu0 %v6142
  %8280 = vmatpush.bf16.msra.mxu0 %v6141
  %8281 = vmatpush.bf16.msra.mxu0 %v6140
  %8282 = vmatpush.bf16.msra.mxu0 %v6139
  %8283 = vmatpush.bf16.msra.mxu0 %v6138
  %8284 = vmatpush.bf16.msra.mxu0 %v6137
  %8285 = vmatmul.bf16.gmra.mxu0 %v2107
  %v8286 = vpop.f32.mrf.mxu0
  %v8287 = vadd.f32 %v8273, %v8286
  %v8288 = vpop.f32.mrf.mxu0
  %v8289 = vadd.f32 %v8275, %v8288
  %8290 = vdwg.mxu0
  %8291 = vmatpush.bf16.msra.mxu0 %v6152
  %8292 = vmatpush.bf16.msra.mxu0 %v6151
  %8293 = vmatpush.bf16.msra.mxu0 %v6150
  %8294 = vmatpush.bf16.msra.mxu0 %v6149
  %8295 = vmatpush.bf16.msra.mxu0 %v6148
  %8296 = vmatpush.bf16.msra.mxu0 %v6147
  %8297 = vmatpush.bf16.msra.mxu0 %v6146
  %8298 = vmatpush.bf16.msra.mxu0 %v6145
  %8299 = vmatmul.bf16.gmra.mxu0 %v2108
  %v8300 = vpop.f32.mrf.mxu0
  %v8301 = vadd.f32 %v8287, %v8300
  %v8302 = vpop.f32.mrf.mxu0
  %v8303 = vadd.f32 %v8289, %v8302
  %8304 = vdwg.mxu0
  %8305 = vmatpush.bf16.msra.mxu0 %v6160
  %8306 = vmatpush.bf16.msra.mxu0 %v6159
  %8307 = vmatpush.bf16.msra.mxu0 %v6158
  %8308 = vmatpush.bf16.msra.mxu0 %v6157
  %8309 = vmatpush.bf16.msra.mxu0 %v6156
  %8310 = vmatpush.bf16.msra.mxu0 %v6155
  %8311 = vmatpush.bf16.msra.mxu0 %v6154
  %8312 = vmatpush.bf16.msra.mxu0 %v6153
  %8313 = vmatmul.bf16.gmra.mxu0 %v2109
  %v8314 = vpop.f32.mrf.mxu0
  %v8315 = vadd.f32 %v8301, %v8314
  %v8316 = vpop.f32.mrf.mxu0
  %v8317 = vadd.f32 %v8303, %v8316
  %8318 = vdwg.mxu0
  %8319 = vmatpush.bf16.msra.mxu0 %v6168
  %8320 = vmatpush.bf16.msra.mxu0 %v6167
  %8321 = vmatpush.bf16.msra.mxu0 %v6166
  %8322 = vmatpush.bf16.msra.mxu0 %v6165
  %8323 = vmatpush.bf16.msra.mxu0 %v6164
  %8324 = vmatpush.bf16.msra.mxu0 %v6163
  %8325 = vmatpush.bf16.msra.mxu0 %v6162
  %8326 = vmatpush.bf16.msra.mxu0 %v6161
  %8327 = vmatmul.bf16.gmra.mxu0 %v2110
  %v8328 = vpop.f32.mrf.mxu0
  %v8329 = vadd.f32 %v8315, %v8328
  %v8330 = vpop.f32.mrf.mxu0
  %v8331 = vadd.f32 %v8317, %v8330
  %8332 = vdwg.mxu0
  %8333 = vmatpush.bf16.msra.mxu0 %v6176
  %8334 = vmatpush.bf16.msra.mxu0 %v6175
  %8335 = vmatpush.bf16.msra.mxu0 %v6174
  %8336 = vmatpush.bf16.msra.mxu0 %v6173
  %8337 = vmatpush.bf16.msra.mxu0 %v6172
  %8338 = vmatpush.bf16.msra.mxu0 %v6171
  %8339 = vmatpush.bf16.msra.mxu0 %v6170
  %8340 = vmatpush.bf16.msra.mxu0 %v6169
  %8341 = vmatmul.bf16.gmra.mxu0 %v2111
  %v8342 = vpop.f32.mrf.mxu0
  %v8343 = vadd.f32 %v8329, %v8342
  %v8344 = vpop.f32.mrf.mxu0
  %v8345 = vadd.f32 %v8331, %v8344
  %8346 = vdwg.mxu0
  %8347 = vmatpush.bf16.msra.mxu0 %v6184
  %8348 = vmatpush.bf16.msra.mxu0 %v6183
  %8349 = vmatpush.bf16.msra.mxu0 %v6182
  %8350 = vmatpush.bf16.msra.mxu0 %v6181
  %8351 = vmatpush.bf16.msra.mxu0 %v6180
  %8352 = vmatpush.bf16.msra.mxu0 %v6179
  %8353 = vmatpush.bf16.msra.mxu0 %v6178
  %8354 = vmatpush.bf16.msra.mxu0 %v6177
  %8355 = vmatmul.bf16.gmra.mxu0 %v2112
  %v8356 = vpop.f32.mrf.mxu0
  %v8357 = vadd.f32 %v8343, %v8356
  %v8358 = vpop.f32.mrf.mxu0
  %v8359 = vadd.f32 %v8345, %v8358
  %8360 = vdwg.mxu0
  %8361 = vmatpush.bf16.msra.mxu0 %v6192
  %8362 = vmatpush.bf16.msra.mxu0 %v6191
  %8363 = vmatpush.bf16.msra.mxu0 %v6190
  %8364 = vmatpush.bf16.msra.mxu0 %v6189
  %8365 = vmatpush.bf16.msra.mxu0 %v6188
  %8366 = vmatpush.bf16.msra.mxu0 %v6187
  %8367 = vmatpush.bf16.msra.mxu0 %v6186
  %8368 = vmatpush.bf16.msra.mxu0 %v6185
  %8369 = vmatmul.bf16.gmra.mxu0 %v2113
  %v8370 = vpop.f32.mrf.mxu0
  %v8371 = vadd.f32 %v8357, %v8370
  %v8372 = vpop.f32.mrf.mxu0
  %v8373 = vadd.f32 %v8359, %v8372
  %8374 = vdwg.mxu0
  %8375 = vmatpush.bf16.msra.mxu0 %v6200
  %8376 = vmatpush.bf16.msra.mxu0 %v6199
  %8377 = vmatpush.bf16.msra.mxu0 %v6198
  %8378 = vmatpush.bf16.msra.mxu0 %v6197
  %8379 = vmatpush.bf16.msra.mxu0 %v6196
  %8380 = vmatpush.bf16.msra.mxu0 %v6195
  %8381 = vmatpush.bf16.msra.mxu0 %v6194
  %8382 = vmatpush.bf16.msra.mxu0 %v6193
  %8383 = vmatmul.bf16.gmra.mxu0 %v2114
  %v8384 = vpop.f32.mrf.mxu0
  %v8385 = vadd.f32 %v8371, %v8384
  %v8386 = vpop.f32.mrf.mxu0
  %v8387 = vadd.f32 %v8373, %v8386
  %8388 = vdwg.mxu0
  %8389 = vmatpush.bf16.msra.mxu0 %v6208
  %8390 = vmatpush.bf16.msra.mxu0 %v6207
  %8391 = vmatpush.bf16.msra.mxu0 %v6206
  %8392 = vmatpush.bf16.msra.mxu0 %v6205
  %8393 = vmatpush.bf16.msra.mxu0 %v6204
  %8394 = vmatpush.bf16.msra.mxu0 %v6203
  %8395 = vmatpush.bf16.msra.mxu0 %v6202
  %8396 = vmatpush.bf16.msra.mxu0 %v6201
  %8397 = vmatmul.bf16.gmra.mxu0 %v2115
  %v8398 = vpop.f32.mrf.mxu0
  %v8399 = vadd.f32 %v8385, %v8398
  %v8400 = vpop.f32.mrf.mxu0
  %v8401 = vadd.f32 %v8387, %v8400
  %8402 = vdwg.mxu0
  %8403 = vmatpush.bf16.msra.mxu0 %v6216
  %8404 = vmatpush.bf16.msra.mxu0 %v6215
  %8405 = vmatpush.bf16.msra.mxu0 %v6214
  %8406 = vmatpush.bf16.msra.mxu0 %v6213
  %8407 = vmatpush.bf16.msra.mxu0 %v6212
  %8408 = vmatpush.bf16.msra.mxu0 %v6211
  %8409 = vmatpush.bf16.msra.mxu0 %v6210
  %8410 = vmatpush.bf16.msra.mxu0 %v6209
  %8411 = vmatmul.bf16.gmra.mxu0 %v2116
  %v8412 = vpop.f32.mrf.mxu0
  %v8413 = vadd.f32 %v8399, %v8412
  %v8414 = vpop.f32.mrf.mxu0
  %v8415 = vadd.f32 %v8401, %v8414
  %8416 = vdwg.mxu0
  %v8417 = vld [vmem:[%s2] sm:$0x1]
  %v8419 = vperm.slane %v8417, 0
  %v8421 = vmul.f32 %v8413, %v8419
  %v8422 = vmul.f32 %v8415, %v8419
  %v8423 = vld [vmem:[%s3] sm:$0x1]
  %v8425 = vperm.slane %v8423, 0
  %v8427 = vadd.f32 %v8421, %v8425
  %v8428 = vadd.f32 %v8422, %v8425
  %8429 = vst [vmem:[%s4] sm:$0xff] %v8427
  %8430 = vst [vmem:[%s4 + $0x8] sm:$0xff] %v8428
  // Predicated region
  $region18: #{forward.7} parent=0 // pred_check
    _
  $region19: #{forward.7} parent=0 // pred_check_branch
    %8432 = sbr.rel (0) target = $region21
  $region20: #{forward.7} parent=0 // pred_region
    _
  $region21: #{forward.7} parent=0 // pred_fallthru
    _
  // Predicated region
  $region22: #{forward.7} parent=0 // pred_check
    _
  $region23: #{forward.7} parent=0 // pred_check_branch
    %8434 = sbr.rel (0) target = $region25
  $region24: #{forward.7} parent=0 // pred_region
    _
  $region25: #{forward.7} parent=0 // pred_fallthru
    _

</llo_original>
